<compile_context>
chip_gen: v7x
topology: tpu7x:2x2x1
jax: 0.10.0
libtpu: 0.0.40
codegen_flags: <defaults>
</compile_context>

<pallas_src>
import jax
import jax.numpy as jnp
from jax.experimental import pallas as pl
from jax.experimental.pallas import tpu as pltpu

# Network constants (from Net.__init__ / 28x28 MNIST input).
K5 = 5                    # conv kernel size
H1, W1 = 24, 24           # conv1 output spatial
P1H, P1W = 12, 12         # after pool1
H2, W2 = 8, 8             # conv2 output spatial
P2H, P2W = 4, 4           # after pool2
C1, C2 = 20, 50           # conv channels
K2 = K5 * K5 * C1         # 500 = conv2 im2col contraction depth
FC1_IN = P2H * P2W * C2   # 800
HID, NCLS = 500, 10

# Max batch tile per grid step.  32 keeps worst-case VMEM (double-buffered
# 128-lane-padded patch block + f32 conv1/pool1 temporaries) ~35-40 MiB, safe
# for v7x's 64 MiB VMEM; raise to 64 on v5e/v6e with a ~96 MiB vmem limit.
TB_MAX = 32
VMEM_LIMIT = 48 * 1024 * 1024


# ----------------------------------------------------------------------------
# The fused Pallas kernel (one grid step = tb images, everything in VMEM)
# ----------------------------------------------------------------------------
def _net_kernel(p_ref, w1_ref, b1_ref, w2_ref, b2_ref,
                wf1_ref, bf1_ref, wf2_ref, bf2_ref, out_ref):
    tb = out_ref.shape[0]

    # ---- conv1: im2col patches (H1*W1*tb, 25) @ (25, C1), bias + ReLU (f32) ----
    a1 = jnp.dot(p_ref[...], w1_ref[...], preferred_element_type=jnp.float32)
    a1 = jnp.maximum(a1 + b1_ref[...], 0.0)              # (H1*W1*tb, C1)

    # ---- maxpool1 2x2: pooling partners live on MAJOR dims after reshape ----
    # row = (oh*W1 + ow)*tb + n ; ow = 2*ow2 + pj ; oh = 2*oh2 + pi
    a1 = a1.reshape(H1, P1W, 2, tb, C1)                   # (oh, ow2, pj, n, c)
    a1 = jnp.maximum(a1[:, :, 0], a1[:, :, 1])            # (H1, P1W, tb, C1)
    a1 = a1.reshape(P1H, 2, P1W, tb, C1)                  # (oh2, pi, ow2, n, c)
    p1 = jnp.maximum(a1[:, 0], a1[:, 1])                  # (P1H, P1W, tb, C1) f32
    p1 = p1.astype(w2_ref.dtype)                          # single bf16 cast

    # ---- conv2 as ONE GEMM: lane-concat 25 shifted windows -> K=500 ----
    # slab column = (di*5 + dj)*C1 + ci, matching w2_ref's K-major row order.
    wins = [p1[di:di + H2, dj:dj + W2]                     # each (H2, W2, tb, C1)
            for di in range(K5) for dj in range(K5)]
    slab = jnp.concatenate(wins, axis=-1)                  # (H2, W2, tb, 500)
    slab = slab.reshape(H2 * W2 * tb, K2)                  # (H2*W2*tb, 500)
    y2 = jnp.dot(slab, w2_ref[...], preferred_element_type=jnp.float32)
    y2 = jnp.maximum(y2 + b2_ref[...], 0.0)                # (H2*W2*tb, C2)

    # ---- maxpool2 2x2 (same major-dim trick) ----
    y2 = y2.reshape(H2, P2W, 2, tb, C2)
    y2 = jnp.maximum(y2[:, :, 0], y2[:, :, 1])             # (H2, P2W, tb, C2)
    y2 = y2.reshape(P2H, 2, P2W, tb, C2)
    p2 = jnp.maximum(y2[:, 0], y2[:, 1])                   # (P2H, P2W, tb, C2) f32
    p2 = p2.astype(wf1_ref.dtype)                          # single bf16 cast

    # ---- fc1: lane-dense (tb, 800) slab, one big-K matmul ----
    flat = jnp.concatenate(
        [p2[i, j] for i in range(P2H) for j in range(P2W)], axis=-1)   # (tb, 800)
    h = jnp.dot(flat, wf1_ref[...],
                preferred_element_type=jnp.float32) + bf1_ref[...]
    h = jnp.maximum(h, 0.0)                                # (tb, HID) f32

    # ---- fc2 + log_softmax (fused, f32) ----
    logits = jnp.dot(h.astype(wf2_ref.dtype), wf2_ref[...],
                     preferred_element_type=jnp.float32) + bf2_ref[...]  # (tb, 10)
    m = jnp.max(logits, axis=-1, keepdims=True)
    s = logits - m
    lse = jnp.log(jnp.sum(jnp.exp(s), axis=-1, keepdims=True))
    out_ref[...] = (s - lse).astype(out_ref.dtype)


# ----------------------------------------------------------------------------
# One-time weight prep (outside jit): reshape / permute / cast to bf16
# ----------------------------------------------------------------------------
def prep_params(params, dtype=jnp.bfloat16):
    w1, b1, w2, b2, wf1, bf1, wf2, bf2 = params
    # conv1 weight as im2col matrix: k = di*5 + dj
    w1m = w1.reshape(C1, K5 * K5).T.astype(dtype)                       # (25, 20)
    # conv2 weight K-major, matching the in-kernel window concat order:
    # row = (di*5 + dj)*C1 + ci  ->  w2m[row, co] = w2[co, ci, di, dj]
    w2m = w2.transpose(2, 3, 1, 0).reshape(K2, C2).astype(dtype)        # (500, 50)
    # fc1: fold the PyTorch NCHW flatten (c*16 + h*4 + w) into our (h, w, c) order
    wf1m = (wf1.T.reshape(C2, P2H, P2W, HID)
            .transpose(1, 2, 0, 3).reshape(FC1_IN, HID).astype(dtype))  # (800, 500)
    wf2m = wf2.T.astype(dtype)                                          # (500, 10)
    return (w1m, b1.reshape(1, C1).astype(jnp.float32),
            w2m, b2.reshape(1, C2).astype(jnp.float32),
            wf1m, bf1.reshape(1, HID).astype(jnp.float32),
            wf2m, bf2.reshape(1, NCLS).astype(jnp.float32))


# ----------------------------------------------------------------------------
# Glue: conv1 im2col, rows ordered (tile, oh, ow, n_local) so the kernel's
# conv1 output lands directly in the (H, W, TB, C) layout.
# ----------------------------------------------------------------------------
def _im2col_conv1(x, tb):
    n = x.shape[0]
    img = x.reshape(n, 28, 28).astype(jnp.bfloat16)
    cols = [img[:, di:di + H1, dj:dj + W1]
            for di in range(K5) for dj in range(K5)]
    p = jnp.stack(cols, axis=-1)                              # (n, 24, 24, 25)
    p = p.reshape(n // tb, tb, H1, W1, K5 * K5).transpose(0, 2, 3, 1, 4)
    return p.reshape(n * H1 * W1, K5 * K5)


def _pick_tb(n):
    n8 = ((n + 7) // 8) * 8            # sublane-aligned batch tile
    return min(TB_MAX, n8)


# ----------------------------------------------------------------------------
# Forward pass
# ----------------------------------------------------------------------------
@jax.jit
def net_forward(x, prepped):
    """x: (N, 1, 28, 28) float32 -> (N, 10) log-probabilities."""
    n = x.shape[0]
    tb = _pick_tb(n)
    n_pad = ((n + tb - 1) // tb) * tb
    if n_pad != n:
        x = jnp.concatenate(
            [x, jnp.zeros((n_pad - n,) + x.shape[1:], x.dtype)], axis=0)

    patches = _im2col_conv1(x, tb)                            # (n_pad*576, 25) bf16
    w1m, b1m, w2m, b2m, wf1m, bf1m, wf2m, bf2m = prepped
    n_tiles = n_pad // tb
    rows = H1 * W1 * tb

    out = pl.pallas_call(
        _net_kernel,
        out_shape=jax.ShapeDtypeStruct((n_pad, NCLS), jnp.float32),
        grid=(n_tiles,),
        in_specs=[
            pl.BlockSpec((rows, K5 * K5), lambda t: (t, 0)),          # patches (tiled)
            pl.BlockSpec((K5 * K5, C1), lambda t: (0, 0)),            # w1
            pl.BlockSpec((1, C1), lambda t: (0, 0)),                  # b1
            pl.BlockSpec((K2, C2), lambda t: (0, 0)),                 # w2 (K-major)
            pl.BlockSpec((1, C2), lambda t: (0, 0)),                  # b2
            pl.BlockSpec((FC1_IN, HID), lambda t: (0, 0)),            # wf1
            pl.BlockSpec((1, HID), lambda t: (0, 0)),                 # bf1
            pl.BlockSpec((HID, NCLS), lambda t: (0, 0)),              # wf2
            pl.BlockSpec((1, NCLS), lambda t: (0, 0)),                # bf2
        ],
        out_specs=pl.BlockSpec((tb, NCLS), lambda t: (t, 0)),
        compiler_params=pltpu.CompilerParams(
            dimension_semantics=("parallel",),
            vmem_limit_bytes=VMEM_LIMIT),
    )(patches, w1m, b1m, w2m, b2m, wf1m, bf1m, wf2m, bf2m)
    return out[:n]


# ----------------------------------------------------------------------------
# Pure-JAX f32 reference (mirrors the PyTorch module) for correctness check
# ----------------------------------------------------------------------------
def net_forward_reference(x, params):
    w1, b1, w2, b2, wf1, bf1, wf2, bf2 = params
    dn = ("NCHW", "OIHW", "NCHW")
    y = jax.lax.conv_general_dilated(x, w1, (1, 1), "VALID",
                                     dimension_numbers=dn) + b1[None, :, None, None]
    y = jnp.maximum(y, 0.0)
    y = jax.lax.reduce_window(y, -jnp.inf, jax.lax.max,
                              (1, 1, 2, 2), (1, 1, 2, 2), "VALID")
    y = jax.lax.conv_general_dilated(y, w2, (1, 1), "VALID",
                                     dimension_numbers=dn) + b2[None, :, None, None]
    y = jnp.maximum(y, 0.0)
    y = jax.lax.reduce_window(y, -jnp.inf, jax.lax.max,
                              (1, 1, 2, 2), (1, 1, 2, 2), "VALID")
    y = y.reshape(y.shape[0], -1)
    y = jnp.maximum(y @ wf1.T + bf1, 0.0)
    y = y @ wf2.T + bf2
    return jax.nn.log_softmax(y, axis=-1)


# ----------------------------------------------------------------------------
# Deterministic parameter init (shapes from Net.__init__; synthetic values)
# ----------------------------------------------------------------------------
def init_params(key):
    def uniform(k, shape, fan_in):
        bound = 1.0 / jnp.sqrt(jnp.float32(fan_in))
        return jax.random.uniform(k, shape, jnp.float32, -bound, bound)

    ks = jax.random.split(key, 8)
    w1 = uniform(ks[0], (20, 1, 5, 5), 1 * 5 * 5)
    b1 = uniform(ks[1], (20,), 1 * 5 * 5)
    w2 = uniform(ks[2], (50, 20, 5, 5), 20 * 5 * 5)
    b2 = uniform(ks[3], (50,), 20 * 5 * 5)
    wf1 = uniform(ks[4], (500, 800), 800)
    bf1 = uniform(ks[5], (500,), 800)
    wf2 = uniform(ks[6], (10, 500), 500)
    bf2 = uniform(ks[7], (10,), 500)
    return (w1, b1, w2, b2, wf1, bf1, wf2, bf2)


if __name__ == "__main__":
    key = jax.random.PRNGKey(0)
    k_x, k_p = jax.random.split(key)
    params = init_params(k_p)
    prepped = prep_params(params)

    # MNIST-shaped inputs (28x28 is required by the hard-coded 4*4*50 flatten).
    x_all = jax.random.normal(k_x, (40, 1, 28, 28), dtype=jnp.float32)

    # batch=2 smoke test (tb=8, 1 tile) and batch=40 (tb=32, 2 tiles, padded).
    for n in (2, 40):
        x = x_all[:n]
        out = net_forward(x, prepped)
        jax.block_until_ready(out)

        assert out.shape == (n, 10)
        # log_softmax rows must normalize (prob space sums to 1)
        assert jnp.allclose(jnp.sum(jnp.exp(out), axis=1), 1.0, atol=1e-3)
        # match the f32 reference (bf16 GEMM operands -> loose tolerance)
        ref = net_forward_reference(x, params)
        assert jnp.allclose(out, ref, atol=1e-1, rtol=1e-1), (
            float(jnp.max(jnp.abs(out - ref))))

    print("KERNEL_OK")
</pallas_src>

<mosaic_0001>
module attributes {stable_mosaic.version = 11 : i64} {
  func.func @_net_kernel(%arg0: i32, %arg1: memref<4608x25xbf16, #tpu.memory_space<vmem>>, %arg2: memref<25x20xbf16, #tpu.memory_space<vmem>>, %arg3: memref<1x20xf32, #tpu.memory_space<vmem>>, %arg4: memref<500x50xbf16, #tpu.memory_space<vmem>>, %arg5: memref<1x50xf32, #tpu.memory_space<vmem>>, %arg6: memref<800x500xbf16, #tpu.memory_space<vmem>>, %arg7: memref<1x500xf32, #tpu.memory_space<vmem>>, %arg8: memref<500x10xbf16, #tpu.memory_space<vmem>>, %arg9: memref<1x10xf32, #tpu.memory_space<vmem>>, %arg10: memref<8x10xf32, #tpu.memory_space<vmem>>) attributes {dimension_semantics = [#tpu.dimension_semantics<parallel>], iteration_bounds = array<i64: 1>, scalar_prefetch = 0 : i64, scratch_operands = 0 : i64, tpu.core_type = #tpu.core_type<tc>, window_params = [{transform_indices = @transform_0, window_bounds = array<i64: 4608, 25>}, {pipeline_mode = #tpu.pipeline_mode<synchronous>, transform_indices = @transform_1, window_bounds = array<i64: 25, 20>}, {pipeline_mode = #tpu.pipeline_mode<synchronous>, transform_indices = @transform_2, window_bounds = array<i64: 1, 20>}, {pipeline_mode = #tpu.pipeline_mode<synchronous>, transform_indices = @transform_3, window_bounds = array<i64: 500, 50>}, {pipeline_mode = #tpu.pipeline_mode<synchronous>, transform_indices = @transform_4, window_bounds = array<i64: 1, 50>}, {pipeline_mode = #tpu.pipeline_mode<synchronous>, transform_indices = @transform_5, window_bounds = array<i64: 800, 500>}, {pipeline_mode = #tpu.pipeline_mode<synchronous>, transform_indices = @transform_6, window_bounds = array<i64: 1, 500>}, {pipeline_mode = #tpu.pipeline_mode<synchronous>, transform_indices = @transform_7, window_bounds = array<i64: 500, 10>}, {pipeline_mode = #tpu.pipeline_mode<synchronous>, transform_indices = @transform_8, window_bounds = array<i64: 1, 10>}, {transform_indices = @transform_9, window_bounds = array<i64: 8, 10>}]} {
    %c0 = arith.constant 0 : index
    %c0_0 = arith.constant 0 : index
    %0 = vector.load %arg1[%c0, %c0_0] : memref<4608x25xbf16, #tpu.memory_space<vmem>>, vector<4608x25xbf16>
    %c0_1 = arith.constant 0 : index
    %c0_2 = arith.constant 0 : index
    %1 = vector.load %arg2[%c0_1, %c0_2] : memref<25x20xbf16, #tpu.memory_space<vmem>>, vector<25x20xbf16>
    %cst = arith.constant dense<0.000000e+00> : vector<4608x20xf32>
    %2 = tpu.matmul %0, %1, %cst {dimension_numbers = #tpu.dot_dimension_numbers<[1], [0], [0], [1], [0, 0, 1, 1], [], []>} : vector<4608x25xbf16>, vector<25x20xbf16>, vector<4608x20xf32> -> vector<4608x20xf32>
    %c0_3 = arith.constant 0 : index
    %c0_4 = arith.constant 0 : index
    %3 = vector.load %arg3[%c0_3, %c0_4] : memref<1x20xf32, #tpu.memory_space<vmem>>, vector<1x20xf32>
    %4 = vector.broadcast %3 : vector<1x20xf32> to vector<4608x20xf32>
    %5 = arith.addf %2, %4 : vector<4608x20xf32>
    %cst_5 = arith.constant 0.000000e+00 : f32
    %6 = vector.broadcast %cst_5 : f32 to vector<4608x20xf32>
    %7 = arith.maximumf %5, %6 : vector<4608x20xf32>
    %8 = vector.shape_cast %7 : vector<4608x20xf32> to vector<24x12x2x8x20xf32>
    %9 = vector.extract_strided_slice %8 {offsets = [0, 0, 0, 0, 0], sizes = [24, 12, 1, 8, 20], strides = [1, 1, 1, 1, 1]} : vector<24x12x2x8x20xf32> to vector<24x12x1x8x20xf32>
    %10 = vector.shape_cast %9 : vector<24x12x1x8x20xf32> to vector<24x12x8x20xf32>
    %11 = vector.extract_strided_slice %8 {offsets = [0, 0, 1, 0, 0], sizes = [24, 12, 1, 8, 20], strides = [1, 1, 1, 1, 1]} : vector<24x12x2x8x20xf32> to vector<24x12x1x8x20xf32>
    %12 = vector.shape_cast %11 : vector<24x12x1x8x20xf32> to vector<24x12x8x20xf32>
    %13 = arith.maximumf %10, %12 : vector<24x12x8x20xf32>
    %14 = vector.shape_cast %13 : vector<24x12x8x20xf32> to vector<12x2x12x8x20xf32>
    %15 = vector.extract_strided_slice %14 {offsets = [0, 0, 0, 0, 0], sizes = [12, 1, 12, 8, 20], strides = [1, 1, 1, 1, 1]} : vector<12x2x12x8x20xf32> to vector<12x1x12x8x20xf32>
    %16 = vector.shape_cast %15 : vector<12x1x12x8x20xf32> to vector<12x12x8x20xf32>
    %17 = vector.extract_strided_slice %14 {offsets = [0, 1, 0, 0, 0], sizes = [12, 1, 12, 8, 20], strides = [1, 1, 1, 1, 1]} : vector<12x2x12x8x20xf32> to vector<12x1x12x8x20xf32>
    %18 = vector.shape_cast %17 : vector<12x1x12x8x20xf32> to vector<12x12x8x20xf32>
    %19 = arith.maximumf %16, %18 : vector<12x12x8x20xf32>
    %20 = arith.truncf %19 : vector<12x12x8x20xf32> to vector<12x12x8x20xbf16>
    %21 = vector.extract_strided_slice %20 {offsets = [0, 0, 0, 0], sizes = [8, 8, 8, 20], strides = [1, 1, 1, 1]} : vector<12x12x8x20xbf16> to vector<8x8x8x20xbf16>
    %22 = vector.extract_strided_slice %20 {offsets = [0, 1, 0, 0], sizes = [8, 8, 8, 20], strides = [1, 1, 1, 1]} : vector<12x12x8x20xbf16> to vector<8x8x8x20xbf16>
    %23 = vector.extract_strided_slice %20 {offsets = [0, 2, 0, 0], sizes = [8, 8, 8, 20], strides = [1, 1, 1, 1]} : vector<12x12x8x20xbf16> to vector<8x8x8x20xbf16>
    %24 = vector.extract_strided_slice %20 {offsets = [0, 3, 0, 0], sizes = [8, 8, 8, 20], strides = [1, 1, 1, 1]} : vector<12x12x8x20xbf16> to vector<8x8x8x20xbf16>
    %25 = vector.extract_strided_slice %20 {offsets = [0, 4, 0, 0], sizes = [8, 8, 8, 20], strides = [1, 1, 1, 1]} : vector<12x12x8x20xbf16> to vector<8x8x8x20xbf16>
    %26 = vector.extract_strided_slice %20 {offsets = [1, 0, 0, 0], sizes = [8, 8, 8, 20], strides = [1, 1, 1, 1]} : vector<12x12x8x20xbf16> to vector<8x8x8x20xbf16>
    %27 = vector.extract_strided_slice %20 {offsets = [1, 1, 0, 0], sizes = [8, 8, 8, 20], strides = [1, 1, 1, 1]} : vector<12x12x8x20xbf16> to vector<8x8x8x20xbf16>
    %28 = vector.extract_strided_slice %20 {offsets = [1, 2, 0, 0], sizes = [8, 8, 8, 20], strides = [1, 1, 1, 1]} : vector<12x12x8x20xbf16> to vector<8x8x8x20xbf16>
    %29 = vector.extract_strided_slice %20 {offsets = [1, 3, 0, 0], sizes = [8, 8, 8, 20], strides = [1, 1, 1, 1]} : vector<12x12x8x20xbf16> to vector<8x8x8x20xbf16>
    %30 = vector.extract_strided_slice %20 {offsets = [1, 4, 0, 0], sizes = [8, 8, 8, 20], strides = [1, 1, 1, 1]} : vector<12x12x8x20xbf16> to vector<8x8x8x20xbf16>
    %31 = vector.extract_strided_slice %20 {offsets = [2, 0, 0, 0], sizes = [8, 8, 8, 20], strides = [1, 1, 1, 1]} : vector<12x12x8x20xbf16> to vector<8x8x8x20xbf16>
    %32 = vector.extract_strided_slice %20 {offsets = [2, 1, 0, 0], sizes = [8, 8, 8, 20], strides = [1, 1, 1, 1]} : vector<12x12x8x20xbf16> to vector<8x8x8x20xbf16>
    %33 = vector.extract_strided_slice %20 {offsets = [2, 2, 0, 0], sizes = [8, 8, 8, 20], strides = [1, 1, 1, 1]} : vector<12x12x8x20xbf16> to vector<8x8x8x20xbf16>
    %34 = vector.extract_strided_slice %20 {offsets = [2, 3, 0, 0], sizes = [8, 8, 8, 20], strides = [1, 1, 1, 1]} : vector<12x12x8x20xbf16> to vector<8x8x8x20xbf16>
    %35 = vector.extract_strided_slice %20 {offsets = [2, 4, 0, 0], sizes = [8, 8, 8, 20], strides = [1, 1, 1, 1]} : vector<12x12x8x20xbf16> to vector<8x8x8x20xbf16>
    %36 = vector.extract_strided_slice %20 {offsets = [3, 0, 0, 0], sizes = [8, 8, 8, 20], strides = [1, 1, 1, 1]} : vector<12x12x8x20xbf16> to vector<8x8x8x20xbf16>
    %37 = vector.extract_strided_slice %20 {offsets = [3, 1, 0, 0], sizes = [8, 8, 8, 20], strides = [1, 1, 1, 1]} : vector<12x12x8x20xbf16> to vector<8x8x8x20xbf16>
    %38 = vector.extract_strided_slice %20 {offsets = [3, 2, 0, 0], sizes = [8, 8, 8, 20], strides = [1, 1, 1, 1]} : vector<12x12x8x20xbf16> to vector<8x8x8x20xbf16>
    %39 = vector.extract_strided_slice %20 {offsets = [3, 3, 0, 0], sizes = [8, 8, 8, 20], strides = [1, 1, 1, 1]} : vector<12x12x8x20xbf16> to vector<8x8x8x20xbf16>
    %40 = vector.extract_strided_slice %20 {offsets = [3, 4, 0, 0], sizes = [8, 8, 8, 20], strides = [1, 1, 1, 1]} : vector<12x12x8x20xbf16> to vector<8x8x8x20xbf16>
    %41 = vector.extract_strided_slice %20 {offsets = [4, 0, 0, 0], sizes = [8, 8, 8, 20], strides = [1, 1, 1, 1]} : vector<12x12x8x20xbf16> to vector<8x8x8x20xbf16>
    %42 = vector.extract_strided_slice %20 {offsets = [4, 1, 0, 0], sizes = [8, 8, 8, 20], strides = [1, 1, 1, 1]} : vector<12x12x8x20xbf16> to vector<8x8x8x20xbf16>
    %43 = vector.extract_strided_slice %20 {offsets = [4, 2, 0, 0], sizes = [8, 8, 8, 20], strides = [1, 1, 1, 1]} : vector<12x12x8x20xbf16> to vector<8x8x8x20xbf16>
    %44 = vector.extract_strided_slice %20 {offsets = [4, 3, 0, 0], sizes = [8, 8, 8, 20], strides = [1, 1, 1, 1]} : vector<12x12x8x20xbf16> to vector<8x8x8x20xbf16>
    %45 = vector.extract_strided_slice %20 {offsets = [4, 4, 0, 0], sizes = [8, 8, 8, 20], strides = [1, 1, 1, 1]} : vector<12x12x8x20xbf16> to vector<8x8x8x20xbf16>
    %46 = tpu.concatenate %21, %22, %23, %24, %25, %26, %27, %28, %29, %30, %31, %32, %33, %34, %35, %36 in 3 : vector<8x8x8x20xbf16>, vector<8x8x8x20xbf16>, vector<8x8x8x20xbf16>, vector<8x8x8x20xbf16>, vector<8x8x8x20xbf16>, vector<8x8x8x20xbf16>, vector<8x8x8x20xbf16>, vector<8x8x8x20xbf16>, vector<8x8x8x20xbf16>, vector<8x8x8x20xbf16>, vector<8x8x8x20xbf16>, vector<8x8x8x20xbf16>, vector<8x8x8x20xbf16>, vector<8x8x8x20xbf16>, vector<8x8x8x20xbf16>, vector<8x8x8x20xbf16> -> vector<8x8x8x320xbf16>
    %47 = tpu.concatenate %37, %38, %39, %40, %41, %42, %43, %44, %45 in 3 : vector<8x8x8x20xbf16>, vector<8x8x8x20xbf16>, vector<8x8x8x20xbf16>, vector<8x8x8x20xbf16>, vector<8x8x8x20xbf16>, vector<8x8x8x20xbf16>, vector<8x8x8x20xbf16>, vector<8x8x8x20xbf16>, vector<8x8x8x20xbf16> -> vector<8x8x8x180xbf16>
    %48 = tpu.concatenate %46, %47 in 3 : vector<8x8x8x320xbf16>, vector<8x8x8x180xbf16> -> vector<8x8x8x500xbf16>
    %49 = vector.shape_cast %48 : vector<8x8x8x500xbf16> to vector<512x500xbf16>
    %c0_6 = arith.constant 0 : index
    %c0_7 = arith.constant 0 : index
    %50 = vector.load %arg4[%c0_6, %c0_7] : memref<500x50xbf16, #tpu.memory_space<vmem>>, vector<500x50xbf16>
    %cst_8 = arith.constant dense<0.000000e+00> : vector<512x50xf32>
    %51 = tpu.matmul %49, %50, %cst_8 {dimension_numbers = #tpu.dot_dimension_numbers<[1], [0], [0], [1], [0, 0, 1, 1], [], []>} : vector<512x500xbf16>, vector<500x50xbf16>, vector<512x50xf32> -> vector<512x50xf32>
    %c0_9 = arith.constant 0 : index
    %c0_10 = arith.constant 0 : index
    %52 = vector.load %arg5[%c0_9, %c0_10] : memref<1x50xf32, #tpu.memory_space<vmem>>, vector<1x50xf32>
    %53 = vector.broadcast %52 : vector<1x50xf32> to vector<512x50xf32>
    %54 = arith.addf %51, %53 : vector<512x50xf32>
    %cst_11 = arith.constant 0.000000e+00 : f32
    %55 = vector.broadcast %cst_11 : f32 to vector<512x50xf32>
    %56 = arith.maximumf %54, %55 : vector<512x50xf32>
    %57 = vector.shape_cast %56 : vector<512x50xf32> to vector<8x4x2x8x50xf32>
    %58 = vector.extract_strided_slice %57 {offsets = [0, 0, 0, 0, 0], sizes = [8, 4, 1, 8, 50], strides = [1, 1, 1, 1, 1]} : vector<8x4x2x8x50xf32> to vector<8x4x1x8x50xf32>
    %59 = vector.shape_cast %58 : vector<8x4x1x8x50xf32> to vector<8x4x8x50xf32>
    %60 = vector.extract_strided_slice %57 {offsets = [0, 0, 1, 0, 0], sizes = [8, 4, 1, 8, 50], strides = [1, 1, 1, 1, 1]} : vector<8x4x2x8x50xf32> to vector<8x4x1x8x50xf32>
    %61 = vector.shape_cast %60 : vector<8x4x1x8x50xf32> to vector<8x4x8x50xf32>
    %62 = arith.maximumf %59, %61 : vector<8x4x8x50xf32>
    %63 = vector.shape_cast %62 : vector<8x4x8x50xf32> to vector<4x2x4x8x50xf32>
    %64 = vector.extract_strided_slice %63 {offsets = [0, 0, 0, 0, 0], sizes = [4, 1, 4, 8, 50], strides = [1, 1, 1, 1, 1]} : vector<4x2x4x8x50xf32> to vector<4x1x4x8x50xf32>
    %65 = vector.shape_cast %64 : vector<4x1x4x8x50xf32> to vector<4x4x8x50xf32>
    %66 = vector.extract_strided_slice %63 {offsets = [0, 1, 0, 0, 0], sizes = [4, 1, 4, 8, 50], strides = [1, 1, 1, 1, 1]} : vector<4x2x4x8x50xf32> to vector<4x1x4x8x50xf32>
    %67 = vector.shape_cast %66 : vector<4x1x4x8x50xf32> to vector<4x4x8x50xf32>
    %68 = arith.maximumf %65, %67 : vector<4x4x8x50xf32>
    %69 = arith.truncf %68 : vector<4x4x8x50xf32> to vector<4x4x8x50xbf16>
    %70 = vector.extract_strided_slice %69 {offsets = [0, 0, 0, 0], sizes = [1, 1, 8, 50], strides = [1, 1, 1, 1]} : vector<4x4x8x50xbf16> to vector<1x1x8x50xbf16>
    %71 = vector.shape_cast %70 : vector<1x1x8x50xbf16> to vector<8x50xbf16>
    %72 = vector.extract_strided_slice %69 {offsets = [0, 1, 0, 0], sizes = [1, 1, 8, 50], strides = [1, 1, 1, 1]} : vector<4x4x8x50xbf16> to vector<1x1x8x50xbf16>
    %73 = vector.shape_cast %72 : vector<1x1x8x50xbf16> to vector<8x50xbf16>
    %74 = vector.extract_strided_slice %69 {offsets = [0, 2, 0, 0], sizes = [1, 1, 8, 50], strides = [1, 1, 1, 1]} : vector<4x4x8x50xbf16> to vector<1x1x8x50xbf16>
    %75 = vector.shape_cast %74 : vector<1x1x8x50xbf16> to vector<8x50xbf16>
    %76 = vector.extract_strided_slice %69 {offsets = [0, 3, 0, 0], sizes = [1, 1, 8, 50], strides = [1, 1, 1, 1]} : vector<4x4x8x50xbf16> to vector<1x1x8x50xbf16>
    %77 = vector.shape_cast %76 : vector<1x1x8x50xbf16> to vector<8x50xbf16>
    %78 = vector.extract_strided_slice %69 {offsets = [1, 0, 0, 0], sizes = [1, 1, 8, 50], strides = [1, 1, 1, 1]} : vector<4x4x8x50xbf16> to vector<1x1x8x50xbf16>
    %79 = vector.shape_cast %78 : vector<1x1x8x50xbf16> to vector<8x50xbf16>
    %80 = vector.extract_strided_slice %69 {offsets = [1, 1, 0, 0], sizes = [1, 1, 8, 50], strides = [1, 1, 1, 1]} : vector<4x4x8x50xbf16> to vector<1x1x8x50xbf16>
    %81 = vector.shape_cast %80 : vector<1x1x8x50xbf16> to vector<8x50xbf16>
    %82 = vector.extract_strided_slice %69 {offsets = [1, 2, 0, 0], sizes = [1, 1, 8, 50], strides = [1, 1, 1, 1]} : vector<4x4x8x50xbf16> to vector<1x1x8x50xbf16>
    %83 = vector.shape_cast %82 : vector<1x1x8x50xbf16> to vector<8x50xbf16>
    %84 = vector.extract_strided_slice %69 {offsets = [1, 3, 0, 0], sizes = [1, 1, 8, 50], strides = [1, 1, 1, 1]} : vector<4x4x8x50xbf16> to vector<1x1x8x50xbf16>
    %85 = vector.shape_cast %84 : vector<1x1x8x50xbf16> to vector<8x50xbf16>
    %86 = vector.extract_strided_slice %69 {offsets = [2, 0, 0, 0], sizes = [1, 1, 8, 50], strides = [1, 1, 1, 1]} : vector<4x4x8x50xbf16> to vector<1x1x8x50xbf16>
    %87 = vector.shape_cast %86 : vector<1x1x8x50xbf16> to vector<8x50xbf16>
    %88 = vector.extract_strided_slice %69 {offsets = [2, 1, 0, 0], sizes = [1, 1, 8, 50], strides = [1, 1, 1, 1]} : vector<4x4x8x50xbf16> to vector<1x1x8x50xbf16>
    %89 = vector.shape_cast %88 : vector<1x1x8x50xbf16> to vector<8x50xbf16>
    %90 = vector.extract_strided_slice %69 {offsets = [2, 2, 0, 0], sizes = [1, 1, 8, 50], strides = [1, 1, 1, 1]} : vector<4x4x8x50xbf16> to vector<1x1x8x50xbf16>
    %91 = vector.shape_cast %90 : vector<1x1x8x50xbf16> to vector<8x50xbf16>
    %92 = vector.extract_strided_slice %69 {offsets = [2, 3, 0, 0], sizes = [1, 1, 8, 50], strides = [1, 1, 1, 1]} : vector<4x4x8x50xbf16> to vector<1x1x8x50xbf16>
    %93 = vector.shape_cast %92 : vector<1x1x8x50xbf16> to vector<8x50xbf16>
    %94 = vector.extract_strided_slice %69 {offsets = [3, 0, 0, 0], sizes = [1, 1, 8, 50], strides = [1, 1, 1, 1]} : vector<4x4x8x50xbf16> to vector<1x1x8x50xbf16>
    %95 = vector.shape_cast %94 : vector<1x1x8x50xbf16> to vector<8x50xbf16>
    %96 = vector.extract_strided_slice %69 {offsets = [3, 1, 0, 0], sizes = [1, 1, 8, 50], strides = [1, 1, 1, 1]} : vector<4x4x8x50xbf16> to vector<1x1x8x50xbf16>
    %97 = vector.shape_cast %96 : vector<1x1x8x50xbf16> to vector<8x50xbf16>
    %98 = vector.extract_strided_slice %69 {offsets = [3, 2, 0, 0], sizes = [1, 1, 8, 50], strides = [1, 1, 1, 1]} : vector<4x4x8x50xbf16> to vector<1x1x8x50xbf16>
    %99 = vector.shape_cast %98 : vector<1x1x8x50xbf16> to vector<8x50xbf16>
    %100 = vector.extract_strided_slice %69 {offsets = [3, 3, 0, 0], sizes = [1, 1, 8, 50], strides = [1, 1, 1, 1]} : vector<4x4x8x50xbf16> to vector<1x1x8x50xbf16>
    %101 = vector.shape_cast %100 : vector<1x1x8x50xbf16> to vector<8x50xbf16>
    %102 = tpu.concatenate %71, %73, %75, %77, %79, %81, %83, %85, %87, %89, %91, %93, %95, %97, %99, %101 in 1 : vector<8x50xbf16>, vector<8x50xbf16>, vector<8x50xbf16>, vector<8x50xbf16>, vector<8x50xbf16>, vector<8x50xbf16>, vector<8x50xbf16>, vector<8x50xbf16>, vector<8x50xbf16>, vector<8x50xbf16>, vector<8x50xbf16>, vector<8x50xbf16>, vector<8x50xbf16>, vector<8x50xbf16>, vector<8x50xbf16>, vector<8x50xbf16> -> vector<8x800xbf16>
    %c0_12 = arith.constant 0 : index
    %c0_13 = arith.constant 0 : index
    %103 = vector.load %arg6[%c0_12, %c0_13] : memref<800x500xbf16, #tpu.memory_space<vmem>>, vector<800x500xbf16>
    %cst_14 = arith.constant dense<0.000000e+00> : vector<8x500xf32>
    %104 = tpu.matmul %102, %103, %cst_14 {dimension_numbers = #tpu.dot_dimension_numbers<[1], [0], [0], [1], [0, 0, 1, 1], [], []>} : vector<8x800xbf16>, vector<800x500xbf16>, vector<8x500xf32> -> vector<8x500xf32>
    %c0_15 = arith.constant 0 : index
    %c0_16 = arith.constant 0 : index
    %105 = vector.load %arg7[%c0_15, %c0_16] : memref<1x500xf32, #tpu.memory_space<vmem>>, vector<1x500xf32>
    %106 = vector.broadcast %105 : vector<1x500xf32> to vector<8x500xf32>
    %107 = arith.addf %104, %106 : vector<8x500xf32>
    %cst_17 = arith.constant 0.000000e+00 : f32
    %108 = vector.broadcast %cst_17 : f32 to vector<8x500xf32>
    %109 = arith.maximumf %107, %108 : vector<8x500xf32>
    %110 = arith.truncf %109 : vector<8x500xf32> to vector<8x500xbf16>
    %c0_18 = arith.constant 0 : index
    %c0_19 = arith.constant 0 : index
    %111 = vector.load %arg8[%c0_18, %c0_19] : memref<500x10xbf16, #tpu.memory_space<vmem>>, vector<500x10xbf16>
    %cst_20 = arith.constant dense<0.000000e+00> : vector<8x10xf32>
    %112 = tpu.matmul %110, %111, %cst_20 {dimension_numbers = #tpu.dot_dimension_numbers<[1], [0], [0], [1], [0, 0, 1, 1], [], []>} : vector<8x500xbf16>, vector<500x10xbf16>, vector<8x10xf32> -> vector<8x10xf32>
    %c0_21 = arith.constant 0 : index
    %c0_22 = arith.constant 0 : index
    %113 = vector.load %arg9[%c0_21, %c0_22] : memref<1x10xf32, #tpu.memory_space<vmem>>, vector<1x10xf32>
    %114 = vector.broadcast %113 : vector<1x10xf32> to vector<8x10xf32>
    %115 = arith.addf %112, %114 : vector<8x10xf32>
    %cst_23 = arith.constant dense<0xFF800000> : vector<8xf32>
    %116 = vector.multi_reduction <maximumf>, %115, %cst_23 [1] : vector<8x10xf32> to vector<8xf32>
    %117 = vector.shape_cast %116 : vector<8xf32> to vector<8x1xf32>
    %118 = vector.broadcast %117 : vector<8x1xf32> to vector<8x10xf32>
    %119 = arith.subf %115, %118 : vector<8x10xf32>
    %120 = math.exp %119 : vector<8x10xf32>
    %cst_24 = arith.constant dense<0.000000e+00> : vector<8xf32>
    %121 = vector.multi_reduction <add>, %120, %cst_24 [1] : vector<8x10xf32> to vector<8xf32>
    %122 = vector.shape_cast %121 : vector<8xf32> to vector<8x1xf32>
    %123 = math.log %122 : vector<8x1xf32>
    %124 = vector.broadcast %123 : vector<8x1xf32> to vector<8x10xf32>
    %125 = arith.subf %119, %124 : vector<8x10xf32>
    %c0_25 = arith.constant 0 : index
    %c0_26 = arith.constant 0 : index
    %126 = vector.load %arg10[%c0_25, %c0_26] : memref<8x10xf32, #tpu.memory_space<vmem>>, vector<8x10xf32>
    tpu.vector_store %arg10[%c0_25, %c0_26], %125 {strides = array<i32>} : memref<8x10xf32, #tpu.memory_space<vmem>>, vector<8x10xf32>,
    return
  }
  func.func @transform_0(%arg0: i32) -> (i32, i32) {
    %c0_i32 = arith.constant 0 : i32
    %c0_i32_0 = arith.constant 0 : i32
    return %arg0, %c0_i32 : i32, i32
  }
  func.func @transform_1(%arg0: i32) -> (i32, i32) {
    %c0_i32 = arith.constant 0 : i32
    %c0_i32_0 = arith.constant 0 : i32
    %c0_i32_1 = arith.constant 0 : i32
    return %c0_i32, %c0_i32_0 : i32, i32
  }
  func.func @transform_2(%arg0: i32) -> (i32, i32) {
    %c0_i32 = arith.constant 0 : i32
    %c0_i32_0 = arith.constant 0 : i32
    %c0_i32_1 = arith.constant 0 : i32
    return %c0_i32, %c0_i32_0 : i32, i32
  }
  func.func @transform_3(%arg0: i32) -> (i32, i32) {
    %c0_i32 = arith.constant 0 : i32
    %c0_i32_0 = arith.constant 0 : i32
    %c0_i32_1 = arith.constant 0 : i32
    return %c0_i32, %c0_i32_0 : i32, i32
  }
  func.func @transform_4(%arg0: i32) -> (i32, i32) {
    %c0_i32 = arith.constant 0 : i32
    %c0_i32_0 = arith.constant 0 : i32
    %c0_i32_1 = arith.constant 0 : i32
    return %c0_i32, %c0_i32_0 : i32, i32
  }
  func.func @transform_5(%arg0: i32) -> (i32, i32) {
    %c0_i32 = arith.constant 0 : i32
    %c0_i32_0 = arith.constant 0 : i32
    %c0_i32_1 = arith.constant 0 : i32
    return %c0_i32, %c0_i32_0 : i32, i32
  }
  func.func @transform_6(%arg0: i32) -> (i32, i32) {
    %c0_i32 = arith.constant 0 : i32
    %c0_i32_0 = arith.constant 0 : i32
    %c0_i32_1 = arith.constant 0 : i32
    return %c0_i32, %c0_i32_0 : i32, i32
  }
  func.func @transform_7(%arg0: i32) -> (i32, i32) {
    %c0_i32 = arith.constant 0 : i32
    %c0_i32_0 = arith.constant 0 : i32
    %c0_i32_1 = arith.constant 0 : i32
    return %c0_i32, %c0_i32_0 : i32, i32
  }
  func.func @transform_8(%arg0: i32) -> (i32, i32) {
    %c0_i32 = arith.constant 0 : i32
    %c0_i32_0 = arith.constant 0 : i32
    %c0_i32_1 = arith.constant 0 : i32
    return %c0_i32, %c0_i32_0 : i32, i32
  }
  func.func @transform_9(%arg0: i32) -> (i32, i32) {
    %c0_i32 = arith.constant 0 : i32
    %c0_i32_0 = arith.constant 0 : i32
    return %arg0, %c0_i32 : i32, i32
  }
}

</mosaic_0001>

<llo_original>
// kernel: net_forward.1
$region0: #{net_forward.1}
  #allocation0 [shape = 'u32[]', space=smem, size = 0x4, offset = 0x4, fixed_abs, tag = 'smem constant byte address 0x4 - core index']
  #allocation1 [shape = 'u32[144,128]{1,0:T(1,128)}', space=vmem, size = 0x12000, scoped, tag = 'internal scratch']
  %s0 = inlined_call_operand.vmem [shape: bf16[4608,25], index: 0, kind: input, shape index: {}]
  %s1 = inlined_call_operand.vmem [shape: bf16[25,20], index: 1, kind: input, shape index: {}]
  %s2 = inlined_call_operand.vmem [shape: f32[1,20], index: 2, kind: input, shape index: {}]
  %s3 = inlined_call_operand.vmem [shape: bf16[500,50], index: 3, kind: input, shape index: {}]
  %s4 = inlined_call_operand.vmem [shape: f32[1,50], index: 4, kind: input, shape index: {}]
  %s5 = inlined_call_operand.vmem [shape: bf16[800,500], index: 5, kind: input, shape index: {}]
  %s6 = inlined_call_operand.vmem [shape: f32[1,500], index: 6, kind: input, shape index: {}]
  %s7 = inlined_call_operand.vmem [shape: bf16[500,10], index: 7, kind: input, shape index: {}]
  %s8 = inlined_call_operand.vmem [shape: f32[1,10], index: 8, kind: input, shape index: {}]
  %s9 = inlined_call_operand.vmem [shape: f32[8,10], index: 9, kind: output, shape index: {}]
  %s10 = sld [smem:[#allocation0]]
  $region46: #{net_forward.1} parent=0
    _
  %s12 = ssub.s32 1, %s10
  %s13 = scalar_select 0, %s12, %s10
  // Predicated region
  $region2: #{net_forward.1} parent=0 // pred_check
    _
  $region3: #{net_forward.1} parent=0 // pred_check_branch
    %15 = sbr.rel (0) target = $region5
  $region4: #{net_forward.1} parent=0 // pred_region
    _
  $region5: #{net_forward.1} parent=0 // pred_fallthru
    _
  // Predicated region
  $region6: #{net_forward.1} parent=0 // pred_check
    _
  $region7: #{net_forward.1} parent=0 // pred_check_branch
    %17 = sbr.rel (0) target = $region9
  $region8: #{net_forward.1} parent=0 // pred_region
    _
  $region9: #{net_forward.1} parent=0 // pred_fallthru
    _
  // Predicated region
  $region10: #{net_forward.1} parent=0 // pred_check
    _
  $region11: #{net_forward.1} parent=0 // pred_check_branch
    %19 = sbr.rel (0) target = $region13
  $region12: #{net_forward.1} parent=0 // pred_region
    _
  $region13: #{net_forward.1} parent=0 // pred_fallthru
    _
  // Predicated region
  $region14: #{net_forward.1} parent=0 // pred_check
    _
  $region15: #{net_forward.1} parent=0 // pred_check_branch
    %21 = sbr.rel (0) target = $region17
  $region16: #{net_forward.1} parent=0 // pred_region
    _
  $region17: #{net_forward.1} parent=0 // pred_fallthru
    _
  // Predicated region
  $region18: #{net_forward.1} parent=0 // pred_check
    _
  $region19: #{net_forward.1} parent=0 // pred_check_branch
    %23 = sbr.rel (0) target = $region21
  $region20: #{net_forward.1} parent=0 // pred_region
    _
  $region21: #{net_forward.1} parent=0 // pred_fallthru
    _
  // Predicated region
  $region22: #{net_forward.1} parent=0 // pred_check
    _
  $region23: #{net_forward.1} parent=0 // pred_check_branch
    %25 = sbr.rel (0) target = $region25
  $region24: #{net_forward.1} parent=0 // pred_region
    _
  $region25: #{net_forward.1} parent=0 // pred_fallthru
    _
  // Predicated region
  $region26: #{net_forward.1} parent=0 // pred_check
    _
  $region27: #{net_forward.1} parent=0 // pred_check_branch
    %27 = sbr.rel (0) target = $region29
  $region28: #{net_forward.1} parent=0 // pred_region
    _
  $region29: #{net_forward.1} parent=0 // pred_fallthru
    _
  // Predicated region
  $region30: #{net_forward.1} parent=0 // pred_check
    _
  $region31: #{net_forward.1} parent=0 // pred_check_branch
    %29 = sbr.rel (0) target = $region33
  $region32: #{net_forward.1} parent=0 // pred_region
    _
  $region33: #{net_forward.1} parent=0 // pred_fallthru
    _
  // Predicated region
  $region34: #{net_forward.1} parent=0 // pred_check
    _
  $region35: #{net_forward.1} parent=0 // pred_check_branch
    %31 = sbr.rel (0) target = $region37
  $region36: #{net_forward.1} parent=0 // pred_region
    _
  $region37: #{net_forward.1} parent=0 // pred_fallthru
    _
  %v33 = vld [vmem:[%s0] sm:$0xf]
  %v34 = vld [vmem:[%s0 + $0x4] sm:$0xf]
  %v35 = vld [vmem:[%s0 + $0x8] sm:$0xf]
  %v36 = vld [vmem:[%s0 + $0xc] sm:$0xf]
  %v37 = vld [vmem:[%s0 + $0x10] sm:$0xf]
  %v38 = vld [vmem:[%s0 + $0x14] sm:$0xf]
  %v39 = vld [vmem:[%s0 + $0x18] sm:$0xf]
  %v40 = vld [vmem:[%s0 + $0x1c] sm:$0xf]
  %v41 = vld [vmem:[%s0 + $0x20] sm:$0xf]
  %v42 = vld [vmem:[%s0 + $0x24] sm:$0xf]
  %v43 = vld [vmem:[%s0 + $0x28] sm:$0xf]
  %v44 = vld [vmem:[%s0 + $0x2c] sm:$0xf]
  %v45 = vld [vmem:[%s0 + $0x30] sm:$0xf]
  %v46 = vld [vmem:[%s0 + $0x34] sm:$0xf]
  %v47 = vld [vmem:[%s0 + $0x38] sm:$0xf]
  %v48 = vld [vmem:[%s0 + $0x3c] sm:$0xf]
  %v49 = vld [vmem:[%s0 + $0x40] sm:$0xf]
  %v50 = vld [vmem:[%s0 + $0x44] sm:$0xf]
  %v51 = vld [vmem:[%s0 + $0x48] sm:$0xf]
  %v52 = vld [vmem:[%s0 + $0x4c] sm:$0xf]
  %v53 = vld [vmem:[%s0 + $0x50] sm:$0xf]
  %v54 = vld [vmem:[%s0 + $0x54] sm:$0xf]
  %v55 = vld [vmem:[%s0 + $0x58] sm:$0xf]
  %v56 = vld [vmem:[%s0 + $0x5c] sm:$0xf]
  %v57 = vld [vmem:[%s0 + $0x60] sm:$0xf]
  %v58 = vld [vmem:[%s0 + $0x64] sm:$0xf]
  %v59 = vld [vmem:[%s0 + $0x68] sm:$0xf]
  %v60 = vld [vmem:[%s0 + $0x6c] sm:$0xf]
  %v61 = vld [vmem:[%s0 + $0x70] sm:$0xf]
  %v62 = vld [vmem:[%s0 + $0x74] sm:$0xf]
  %v63 = vld [vmem:[%s0 + $0x78] sm:$0xf]
  %v64 = vld [vmem:[%s0 + $0x7c] sm:$0xf]
  %v65 = vld [vmem:[%s0 + $0x80] sm:$0xf]
  %v66 = vld [vmem:[%s0 + $0x84] sm:$0xf]
  %v67 = vld [vmem:[%s0 + $0x88] sm:$0xf]
  %v68 = vld [vmem:[%s0 + $0x8c] sm:$0xf]
  %v69 = vld [vmem:[%s0 + $0x90] sm:$0xf]
  %v70 = vld [vmem:[%s0 + $0x94] sm:$0xf]
  %v71 = vld [vmem:[%s0 + $0x98] sm:$0xf]
  %v72 = vld [vmem:[%s0 + $0x9c] sm:$0xf]
  %v73 = vld [vmem:[%s0 + $0xa0] sm:$0xf]
  %v74 = vld [vmem:[%s0 + $0xa4] sm:$0xf]
  %v75 = vld [vmem:[%s0 + $0xa8] sm:$0xf]
  %v76 = vld [vmem:[%s0 + $0xac] sm:$0xf]
  %v77 = vld [vmem:[%s0 + $0xb0] sm:$0xf]
  %v78 = vld [vmem:[%s0 + $0xb4] sm:$0xf]
  %v79 = vld [vmem:[%s0 + $0xb8] sm:$0xf]
  %v80 = vld [vmem:[%s0 + $0xbc] sm:$0xf]
  %v81 = vld [vmem:[%s0 + $0xc0] sm:$0xf]
  %v82 = vld [vmem:[%s0 + $0xc4] sm:$0xf]
  %v83 = vld [vmem:[%s0 + $0xc8] sm:$0xf]
  %v84 = vld [vmem:[%s0 + $0xcc] sm:$0xf]
  %v85 = vld [vmem:[%s0 + $0xd0] sm:$0xf]
  %v86 = vld [vmem:[%s0 + $0xd4] sm:$0xf]
  %v87 = vld [vmem:[%s0 + $0xd8] sm:$0xf]
  %v88 = vld [vmem:[%s0 + $0xdc] sm:$0xf]
  %v89 = vld [vmem:[%s0 + $0xe0] sm:$0xf]
  %v90 = vld [vmem:[%s0 + $0xe4] sm:$0xf]
  %v91 = vld [vmem:[%s0 + $0xe8] sm:$0xf]
  %v92 = vld [vmem:[%s0 + $0xec] sm:$0xf]
  %v93 = vld [vmem:[%s0 + $0xf0] sm:$0xf]
  %v94 = vld [vmem:[%s0 + $0xf4] sm:$0xf]
  %v95 = vld [vmem:[%s0 + $0xf8] sm:$0xf]
  %v96 = vld [vmem:[%s0 + $0xfc] sm:$0xf]
  %v97 = vld [vmem:[%s0 + $0x100] sm:$0xf]
  %v98 = vld [vmem:[%s0 + $0x104] sm:$0xf]
  %v99 = vld [vmem:[%s0 + $0x108] sm:$0xf]
  %v100 = vld [vmem:[%s0 + $0x10c] sm:$0xf]
  %v101 = vld [vmem:[%s0 + $0x110] sm:$0xf]
  %v102 = vld [vmem:[%s0 + $0x114] sm:$0xf]
  %v103 = vld [vmem:[%s0 + $0x118] sm:$0xf]
  %v104 = vld [vmem:[%s0 + $0x11c] sm:$0xf]
  %v105 = vld [vmem:[%s0 + $0x120] sm:$0xf]
  %v106 = vld [vmem:[%s0 + $0x124] sm:$0xf]
  %v107 = vld [vmem:[%s0 + $0x128] sm:$0xf]
  %v108 = vld [vmem:[%s0 + $0x12c] sm:$0xf]
  %v109 = vld [vmem:[%s0 + $0x130] sm:$0xf]
  %v110 = vld [vmem:[%s0 + $0x134] sm:$0xf]
  %v111 = vld [vmem:[%s0 + $0x138] sm:$0xf]
  %v112 = vld [vmem:[%s0 + $0x13c] sm:$0xf]
  %v113 = vld [vmem:[%s0 + $0x140] sm:$0xf]
  %v114 = vld [vmem:[%s0 + $0x144] sm:$0xf]
  %v115 = vld [vmem:[%s0 + $0x148] sm:$0xf]
  %v116 = vld [vmem:[%s0 + $0x14c] sm:$0xf]
  %v117 = vld [vmem:[%s0 + $0x150] sm:$0xf]
  %v118 = vld [vmem:[%s0 + $0x154] sm:$0xf]
  %v119 = vld [vmem:[%s0 + $0x158] sm:$0xf]
  %v120 = vld [vmem:[%s0 + $0x15c] sm:$0xf]
  %v121 = vld [vmem:[%s0 + $0x160] sm:$0xf]
  %v122 = vld [vmem:[%s0 + $0x164] sm:$0xf]
  %v123 = vld [vmem:[%s0 + $0x168] sm:$0xf]
  %v124 = vld [vmem:[%s0 + $0x16c] sm:$0xf]
  %v125 = vld [vmem:[%s0 + $0x170] sm:$0xf]
  %v126 = vld [vmem:[%s0 + $0x174] sm:$0xf]
  %v127 = vld [vmem:[%s0 + $0x178] sm:$0xf]
  %v128 = vld [vmem:[%s0 + $0x17c] sm:$0xf]
  %v129 = vld [vmem:[%s0 + $0x180] sm:$0xf]
  %v130 = vld [vmem:[%s0 + $0x184] sm:$0xf]
  %v131 = vld [vmem:[%s0 + $0x188] sm:$0xf]
  %v132 = vld [vmem:[%s0 + $0x18c] sm:$0xf]
  %v133 = vld [vmem:[%s0 + $0x190] sm:$0xf]
  %v134 = vld [vmem:[%s0 + $0x194] sm:$0xf]
  %v135 = vld [vmem:[%s0 + $0x198] sm:$0xf]
  %v136 = vld [vmem:[%s0 + $0x19c] sm:$0xf]
  %v137 = vld [vmem:[%s0 + $0x1a0] sm:$0xf]
  %v138 = vld [vmem:[%s0 + $0x1a4] sm:$0xf]
  %v139 = vld [vmem:[%s0 + $0x1a8] sm:$0xf]
  %v140 = vld [vmem:[%s0 + $0x1ac] sm:$0xf]
  %v141 = vld [vmem:[%s0 + $0x1b0] sm:$0xf]
  %v142 = vld [vmem:[%s0 + $0x1b4] sm:$0xf]
  %v143 = vld [vmem:[%s0 + $0x1b8] sm:$0xf]
  %v144 = vld [vmem:[%s0 + $0x1bc] sm:$0xf]
  %v145 = vld [vmem:[%s0 + $0x1c0] sm:$0xf]
  %v146 = vld [vmem:[%s0 + $0x1c4] sm:$0xf]
  %v147 = vld [vmem:[%s0 + $0x1c8] sm:$0xf]
  %v148 = vld [vmem:[%s0 + $0x1cc] sm:$0xf]
  %v149 = vld [vmem:[%s0 + $0x1d0] sm:$0xf]
  %v150 = vld [vmem:[%s0 + $0x1d4] sm:$0xf]
  %v151 = vld [vmem:[%s0 + $0x1d8] sm:$0xf]
  %v152 = vld [vmem:[%s0 + $0x1dc] sm:$0xf]
  %v153 = vld [vmem:[%s0 + $0x1e0] sm:$0xf]
  %v154 = vld [vmem:[%s0 + $0x1e4] sm:$0xf]
  %v155 = vld [vmem:[%s0 + $0x1e8] sm:$0xf]
  %v156 = vld [vmem:[%s0 + $0x1ec] sm:$0xf]
  %v157 = vld [vmem:[%s0 + $0x1f0] sm:$0xf]
  %v158 = vld [vmem:[%s0 + $0x1f4] sm:$0xf]
  %v159 = vld [vmem:[%s0 + $0x1f8] sm:$0xf]
  %v160 = vld [vmem:[%s0 + $0x1fc] sm:$0xf]
  %v161 = vld [vmem:[%s0 + $0x200] sm:$0xf]
  %v162 = vld [vmem:[%s0 + $0x204] sm:$0xf]
  %v163 = vld [vmem:[%s0 + $0x208] sm:$0xf]
  %v164 = vld [vmem:[%s0 + $0x20c] sm:$0xf]
  %v165 = vld [vmem:[%s0 + $0x210] sm:$0xf]
  %v166 = vld [vmem:[%s0 + $0x214] sm:$0xf]
  %v167 = vld [vmem:[%s0 + $0x218] sm:$0xf]
  %v168 = vld [vmem:[%s0 + $0x21c] sm:$0xf]
  %v169 = vld [vmem:[%s0 + $0x220] sm:$0xf]
  %v170 = vld [vmem:[%s0 + $0x224] sm:$0xf]
  %v171 = vld [vmem:[%s0 + $0x228] sm:$0xf]
  %v172 = vld [vmem:[%s0 + $0x22c] sm:$0xf]
  %v173 = vld [vmem:[%s0 + $0x230] sm:$0xf]
  %v174 = vld [vmem:[%s0 + $0x234] sm:$0xf]
  %v175 = vld [vmem:[%s0 + $0x238] sm:$0xf]
  %v176 = vld [vmem:[%s0 + $0x23c] sm:$0xf]
  %v177 = vld [vmem:[%s0 + $0x240] sm:$0xf]
  %v178 = vld [vmem:[%s0 + $0x244] sm:$0xf]
  %v179 = vld [vmem:[%s0 + $0x248] sm:$0xf]
  %v180 = vld [vmem:[%s0 + $0x24c] sm:$0xf]
  %v181 = vld [vmem:[%s0 + $0x250] sm:$0xf]
  %v182 = vld [vmem:[%s0 + $0x254] sm:$0xf]
  %v183 = vld [vmem:[%s0 + $0x258] sm:$0xf]
  %v184 = vld [vmem:[%s0 + $0x25c] sm:$0xf]
  %v185 = vld [vmem:[%s0 + $0x260] sm:$0xf]
  %v186 = vld [vmem:[%s0 + $0x264] sm:$0xf]
  %v187 = vld [vmem:[%s0 + $0x268] sm:$0xf]
  %v188 = vld [vmem:[%s0 + $0x26c] sm:$0xf]
  %v189 = vld [vmem:[%s0 + $0x270] sm:$0xf]
  %v190 = vld [vmem:[%s0 + $0x274] sm:$0xf]
  %v191 = vld [vmem:[%s0 + $0x278] sm:$0xf]
  %v192 = vld [vmem:[%s0 + $0x27c] sm:$0xf]
  %v193 = vld [vmem:[%s0 + $0x280] sm:$0xf]
  %v194 = vld [vmem:[%s0 + $0x284] sm:$0xf]
  %v195 = vld [vmem:[%s0 + $0x288] sm:$0xf]
  %v196 = vld [vmem:[%s0 + $0x28c] sm:$0xf]
  %v197 = vld [vmem:[%s0 + $0x290] sm:$0xf]
  %v198 = vld [vmem:[%s0 + $0x294] sm:$0xf]
  %v199 = vld [vmem:[%s0 + $0x298] sm:$0xf]
  %v200 = vld [vmem:[%s0 + $0x29c] sm:$0xf]
  %v201 = vld [vmem:[%s0 + $0x2a0] sm:$0xf]
  %v202 = vld [vmem:[%s0 + $0x2a4] sm:$0xf]
  %v203 = vld [vmem:[%s0 + $0x2a8] sm:$0xf]
  %v204 = vld [vmem:[%s0 + $0x2ac] sm:$0xf]
  %v205 = vld [vmem:[%s0 + $0x2b0] sm:$0xf]
  %v206 = vld [vmem:[%s0 + $0x2b4] sm:$0xf]
  %v207 = vld [vmem:[%s0 + $0x2b8] sm:$0xf]
  %v208 = vld [vmem:[%s0 + $0x2bc] sm:$0xf]
  %v209 = vld [vmem:[%s0 + $0x2c0] sm:$0xf]
  %v210 = vld [vmem:[%s0 + $0x2c4] sm:$0xf]
  %v211 = vld [vmem:[%s0 + $0x2c8] sm:$0xf]
  %v212 = vld [vmem:[%s0 + $0x2cc] sm:$0xf]
  %v213 = vld [vmem:[%s0 + $0x2d0] sm:$0xf]
  %v214 = vld [vmem:[%s0 + $0x2d4] sm:$0xf]
  %v215 = vld [vmem:[%s0 + $0x2d8] sm:$0xf]
  %v216 = vld [vmem:[%s0 + $0x2dc] sm:$0xf]
  %v217 = vld [vmem:[%s0 + $0x2e0] sm:$0xf]
  %v218 = vld [vmem:[%s0 + $0x2e4] sm:$0xf]
  %v219 = vld [vmem:[%s0 + $0x2e8] sm:$0xf]
  %v220 = vld [vmem:[%s0 + $0x2ec] sm:$0xf]
  %v221 = vld [vmem:[%s0 + $0x2f0] sm:$0xf]
  %v222 = vld [vmem:[%s0 + $0x2f4] sm:$0xf]
  %v223 = vld [vmem:[%s0 + $0x2f8] sm:$0xf]
  %v224 = vld [vmem:[%s0 + $0x2fc] sm:$0xf]
  %v225 = vld [vmem:[%s0 + $0x300] sm:$0xf]
  %v226 = vld [vmem:[%s0 + $0x304] sm:$0xf]
  %v227 = vld [vmem:[%s0 + $0x308] sm:$0xf]
  %v228 = vld [vmem:[%s0 + $0x30c] sm:$0xf]
  %v229 = vld [vmem:[%s0 + $0x310] sm:$0xf]
  %v230 = vld [vmem:[%s0 + $0x314] sm:$0xf]
  %v231 = vld [vmem:[%s0 + $0x318] sm:$0xf]
  %v232 = vld [vmem:[%s0 + $0x31c] sm:$0xf]
  %v233 = vld [vmem:[%s0 + $0x320] sm:$0xf]
  %v234 = vld [vmem:[%s0 + $0x324] sm:$0xf]
  %v235 = vld [vmem:[%s0 + $0x328] sm:$0xf]
  %v236 = vld [vmem:[%s0 + $0x32c] sm:$0xf]
  %v237 = vld [vmem:[%s0 + $0x330] sm:$0xf]
  %v238 = vld [vmem:[%s0 + $0x334] sm:$0xf]
  %v239 = vld [vmem:[%s0 + $0x338] sm:$0xf]
  %v240 = vld [vmem:[%s0 + $0x33c] sm:$0xf]
  %v241 = vld [vmem:[%s0 + $0x340] sm:$0xf]
  %v242 = vld [vmem:[%s0 + $0x344] sm:$0xf]
  %v243 = vld [vmem:[%s0 + $0x348] sm:$0xf]
  %v244 = vld [vmem:[%s0 + $0x34c] sm:$0xf]
  %v245 = vld [vmem:[%s0 + $0x350] sm:$0xf]
  %v246 = vld [vmem:[%s0 + $0x354] sm:$0xf]
  %v247 = vld [vmem:[%s0 + $0x358] sm:$0xf]
  %v248 = vld [vmem:[%s0 + $0x35c] sm:$0xf]
  %v249 = vld [vmem:[%s0 + $0x360] sm:$0xf]
  %v250 = vld [vmem:[%s0 + $0x364] sm:$0xf]
  %v251 = vld [vmem:[%s0 + $0x368] sm:$0xf]
  %v252 = vld [vmem:[%s0 + $0x36c] sm:$0xf]
  %v253 = vld [vmem:[%s0 + $0x370] sm:$0xf]
  %v254 = vld [vmem:[%s0 + $0x374] sm:$0xf]
  %v255 = vld [vmem:[%s0 + $0x378] sm:$0xf]
  %v256 = vld [vmem:[%s0 + $0x37c] sm:$0xf]
  %v257 = vld [vmem:[%s0 + $0x380] sm:$0xf]
  %v258 = vld [vmem:[%s0 + $0x384] sm:$0xf]
  %v259 = vld [vmem:[%s0 + $0x388] sm:$0xf]
  %v260 = vld [vmem:[%s0 + $0x38c] sm:$0xf]
  %v261 = vld [vmem:[%s0 + $0x390] sm:$0xf]
  %v262 = vld [vmem:[%s0 + $0x394] sm:$0xf]
  %v263 = vld [vmem:[%s0 + $0x398] sm:$0xf]
  %v264 = vld [vmem:[%s0 + $0x39c] sm:$0xf]
  %v265 = vld [vmem:[%s0 + $0x3a0] sm:$0xf]
  %v266 = vld [vmem:[%s0 + $0x3a4] sm:$0xf]
  %v267 = vld [vmem:[%s0 + $0x3a8] sm:$0xf]
  %v268 = vld [vmem:[%s0 + $0x3ac] sm:$0xf]
  %v269 = vld [vmem:[%s0 + $0x3b0] sm:$0xf]
  %v270 = vld [vmem:[%s0 + $0x3b4] sm:$0xf]
  %v271 = vld [vmem:[%s0 + $0x3b8] sm:$0xf]
  %v272 = vld [vmem:[%s0 + $0x3bc] sm:$0xf]
  %v273 = vld [vmem:[%s0 + $0x3c0] sm:$0xf]
  %v274 = vld [vmem:[%s0 + $0x3c4] sm:$0xf]
  %v275 = vld [vmem:[%s0 + $0x3c8] sm:$0xf]
  %v276 = vld [vmem:[%s0 + $0x3cc] sm:$0xf]
  %v277 = vld [vmem:[%s0 + $0x3d0] sm:$0xf]
  %v278 = vld [vmem:[%s0 + $0x3d4] sm:$0xf]
  %v279 = vld [vmem:[%s0 + $0x3d8] sm:$0xf]
  %v280 = vld [vmem:[%s0 + $0x3dc] sm:$0xf]
  %v281 = vld [vmem:[%s0 + $0x3e0] sm:$0xf]
  %v282 = vld [vmem:[%s0 + $0x3e4] sm:$0xf]
  %v283 = vld [vmem:[%s0 + $0x3e8] sm:$0xf]
  %v284 = vld [vmem:[%s0 + $0x3ec] sm:$0xf]
  %v285 = vld [vmem:[%s0 + $0x3f0] sm:$0xf]
  %v286 = vld [vmem:[%s0 + $0x3f4] sm:$0xf]
  %v287 = vld [vmem:[%s0 + $0x3f8] sm:$0xf]
  %v288 = vld [vmem:[%s0 + $0x3fc] sm:$0xf]
  %v289 = vld [vmem:[%s0 + $0x400] sm:$0xf]
  %v290 = vld [vmem:[%s0 + $0x404] sm:$0xf]
  %v291 = vld [vmem:[%s0 + $0x408] sm:$0xf]
  %v292 = vld [vmem:[%s0 + $0x40c] sm:$0xf]
  %v293 = vld [vmem:[%s0 + $0x410] sm:$0xf]
  %v294 = vld [vmem:[%s0 + $0x414] sm:$0xf]
  %v295 = vld [vmem:[%s0 + $0x418] sm:$0xf]
  %v296 = vld [vmem:[%s0 + $0x41c] sm:$0xf]
  %v297 = vld [vmem:[%s0 + $0x420] sm:$0xf]
  %v298 = vld [vmem:[%s0 + $0x424] sm:$0xf]
  %v299 = vld [vmem:[%s0 + $0x428] sm:$0xf]
  %v300 = vld [vmem:[%s0 + $0x42c] sm:$0xf]
  %v301 = vld [vmem:[%s0 + $0x430] sm:$0xf]
  %v302 = vld [vmem:[%s0 + $0x434] sm:$0xf]
  %v303 = vld [vmem:[%s0 + $0x438] sm:$0xf]
  %v304 = vld [vmem:[%s0 + $0x43c] sm:$0xf]
  %v305 = vld [vmem:[%s0 + $0x440] sm:$0xf]
  %v306 = vld [vmem:[%s0 + $0x444] sm:$0xf]
  %v307 = vld [vmem:[%s0 + $0x448] sm:$0xf]
  %v308 = vld [vmem:[%s0 + $0x44c] sm:$0xf]
  %v309 = vld [vmem:[%s0 + $0x450] sm:$0xf]
  %v310 = vld [vmem:[%s0 + $0x454] sm:$0xf]
  %v311 = vld [vmem:[%s0 + $0x458] sm:$0xf]
  %v312 = vld [vmem:[%s0 + $0x45c] sm:$0xf]
  %v313 = vld [vmem:[%s0 + $0x460] sm:$0xf]
  %v314 = vld [vmem:[%s0 + $0x464] sm:$0xf]
  %v315 = vld [vmem:[%s0 + $0x468] sm:$0xf]
  %v316 = vld [vmem:[%s0 + $0x46c] sm:$0xf]
  %v317 = vld [vmem:[%s0 + $0x470] sm:$0xf]
  %v318 = vld [vmem:[%s0 + $0x474] sm:$0xf]
  %v319 = vld [vmem:[%s0 + $0x478] sm:$0xf]
  %v320 = vld [vmem:[%s0 + $0x47c] sm:$0xf]
  %v321 = vld [vmem:[%s0 + $0x480] sm:$0xf]
  %v322 = vld [vmem:[%s0 + $0x484] sm:$0xf]
  %v323 = vld [vmem:[%s0 + $0x488] sm:$0xf]
  %v324 = vld [vmem:[%s0 + $0x48c] sm:$0xf]
  %v325 = vld [vmem:[%s0 + $0x490] sm:$0xf]
  %v326 = vld [vmem:[%s0 + $0x494] sm:$0xf]
  %v327 = vld [vmem:[%s0 + $0x498] sm:$0xf]
  %v328 = vld [vmem:[%s0 + $0x49c] sm:$0xf]
  %v329 = vld [vmem:[%s0 + $0x4a0] sm:$0xf]
  %v330 = vld [vmem:[%s0 + $0x4a4] sm:$0xf]
  %v331 = vld [vmem:[%s0 + $0x4a8] sm:$0xf]
  %v332 = vld [vmem:[%s0 + $0x4ac] sm:$0xf]
  %v333 = vld [vmem:[%s0 + $0x4b0] sm:$0xf]
  %v334 = vld [vmem:[%s0 + $0x4b4] sm:$0xf]
  %v335 = vld [vmem:[%s0 + $0x4b8] sm:$0xf]
  %v336 = vld [vmem:[%s0 + $0x4bc] sm:$0xf]
  %v337 = vld [vmem:[%s0 + $0x4c0] sm:$0xf]
  %v338 = vld [vmem:[%s0 + $0x4c4] sm:$0xf]
  %v339 = vld [vmem:[%s0 + $0x4c8] sm:$0xf]
  %v340 = vld [vmem:[%s0 + $0x4cc] sm:$0xf]
  %v341 = vld [vmem:[%s0 + $0x4d0] sm:$0xf]
  %v342 = vld [vmem:[%s0 + $0x4d4] sm:$0xf]
  %v343 = vld [vmem:[%s0 + $0x4d8] sm:$0xf]
  %v344 = vld [vmem:[%s0 + $0x4dc] sm:$0xf]
  %v345 = vld [vmem:[%s0 + $0x4e0] sm:$0xf]
  %v346 = vld [vmem:[%s0 + $0x4e4] sm:$0xf]
  %v347 = vld [vmem:[%s0 + $0x4e8] sm:$0xf]
  %v348 = vld [vmem:[%s0 + $0x4ec] sm:$0xf]
  %v349 = vld [vmem:[%s0 + $0x4f0] sm:$0xf]
  %v350 = vld [vmem:[%s0 + $0x4f4] sm:$0xf]
  %v351 = vld [vmem:[%s0 + $0x4f8] sm:$0xf]
  %v352 = vld [vmem:[%s0 + $0x4fc] sm:$0xf]
  %v353 = vld [vmem:[%s0 + $0x500] sm:$0xf]
  %v354 = vld [vmem:[%s0 + $0x504] sm:$0xf]
  %v355 = vld [vmem:[%s0 + $0x508] sm:$0xf]
  %v356 = vld [vmem:[%s0 + $0x50c] sm:$0xf]
  %v357 = vld [vmem:[%s0 + $0x510] sm:$0xf]
  %v358 = vld [vmem:[%s0 + $0x514] sm:$0xf]
  %v359 = vld [vmem:[%s0 + $0x518] sm:$0xf]
  %v360 = vld [vmem:[%s0 + $0x51c] sm:$0xf]
  %v361 = vld [vmem:[%s0 + $0x520] sm:$0xf]
  %v362 = vld [vmem:[%s0 + $0x524] sm:$0xf]
  %v363 = vld [vmem:[%s0 + $0x528] sm:$0xf]
  %v364 = vld [vmem:[%s0 + $0x52c] sm:$0xf]
  %v365 = vld [vmem:[%s0 + $0x530] sm:$0xf]
  %v366 = vld [vmem:[%s0 + $0x534] sm:$0xf]
  %v367 = vld [vmem:[%s0 + $0x538] sm:$0xf]
  %v368 = vld [vmem:[%s0 + $0x53c] sm:$0xf]
  %v369 = vld [vmem:[%s0 + $0x540] sm:$0xf]
  %v370 = vld [vmem:[%s0 + $0x544] sm:$0xf]
  %v371 = vld [vmem:[%s0 + $0x548] sm:$0xf]
  %v372 = vld [vmem:[%s0 + $0x54c] sm:$0xf]
  %v373 = vld [vmem:[%s0 + $0x550] sm:$0xf]
  %v374 = vld [vmem:[%s0 + $0x554] sm:$0xf]
  %v375 = vld [vmem:[%s0 + $0x558] sm:$0xf]
  %v376 = vld [vmem:[%s0 + $0x55c] sm:$0xf]
  %v377 = vld [vmem:[%s0 + $0x560] sm:$0xf]
  %v378 = vld [vmem:[%s0 + $0x564] sm:$0xf]
  %v379 = vld [vmem:[%s0 + $0x568] sm:$0xf]
  %v380 = vld [vmem:[%s0 + $0x56c] sm:$0xf]
  %v381 = vld [vmem:[%s0 + $0x570] sm:$0xf]
  %v382 = vld [vmem:[%s0 + $0x574] sm:$0xf]
  %v383 = vld [vmem:[%s0 + $0x578] sm:$0xf]
  %v384 = vld [vmem:[%s0 + $0x57c] sm:$0xf]
  %v385 = vld [vmem:[%s0 + $0x580] sm:$0xf]
  %v386 = vld [vmem:[%s0 + $0x584] sm:$0xf]
  %v387 = vld [vmem:[%s0 + $0x588] sm:$0xf]
  %v388 = vld [vmem:[%s0 + $0x58c] sm:$0xf]
  %v389 = vld [vmem:[%s0 + $0x590] sm:$0xf]
  %v390 = vld [vmem:[%s0 + $0x594] sm:$0xf]
  %v391 = vld [vmem:[%s0 + $0x598] sm:$0xf]
  %v392 = vld [vmem:[%s0 + $0x59c] sm:$0xf]
  %v393 = vld [vmem:[%s0 + $0x5a0] sm:$0xf]
  %v394 = vld [vmem:[%s0 + $0x5a4] sm:$0xf]
  %v395 = vld [vmem:[%s0 + $0x5a8] sm:$0xf]
  %v396 = vld [vmem:[%s0 + $0x5ac] sm:$0xf]
  %v397 = vld [vmem:[%s0 + $0x5b0] sm:$0xf]
  %v398 = vld [vmem:[%s0 + $0x5b4] sm:$0xf]
  %v399 = vld [vmem:[%s0 + $0x5b8] sm:$0xf]
  %v400 = vld [vmem:[%s0 + $0x5bc] sm:$0xf]
  %v401 = vld [vmem:[%s0 + $0x5c0] sm:$0xf]
  %v402 = vld [vmem:[%s0 + $0x5c4] sm:$0xf]
  %v403 = vld [vmem:[%s0 + $0x5c8] sm:$0xf]
  %v404 = vld [vmem:[%s0 + $0x5cc] sm:$0xf]
  %v405 = vld [vmem:[%s0 + $0x5d0] sm:$0xf]
  %v406 = vld [vmem:[%s0 + $0x5d4] sm:$0xf]
  %v407 = vld [vmem:[%s0 + $0x5d8] sm:$0xf]
  %v408 = vld [vmem:[%s0 + $0x5dc] sm:$0xf]
  %v409 = vld [vmem:[%s0 + $0x5e0] sm:$0xf]
  %v410 = vld [vmem:[%s0 + $0x5e4] sm:$0xf]
  %v411 = vld [vmem:[%s0 + $0x5e8] sm:$0xf]
  %v412 = vld [vmem:[%s0 + $0x5ec] sm:$0xf]
  %v413 = vld [vmem:[%s0 + $0x5f0] sm:$0xf]
  %v414 = vld [vmem:[%s0 + $0x5f4] sm:$0xf]
  %v415 = vld [vmem:[%s0 + $0x5f8] sm:$0xf]
  %v416 = vld [vmem:[%s0 + $0x5fc] sm:$0xf]
  %v417 = vld [vmem:[%s0 + $0x600] sm:$0xf]
  %v418 = vld [vmem:[%s0 + $0x604] sm:$0xf]
  %v419 = vld [vmem:[%s0 + $0x608] sm:$0xf]
  %v420 = vld [vmem:[%s0 + $0x60c] sm:$0xf]
  %v421 = vld [vmem:[%s0 + $0x610] sm:$0xf]
  %v422 = vld [vmem:[%s0 + $0x614] sm:$0xf]
  %v423 = vld [vmem:[%s0 + $0x618] sm:$0xf]
  %v424 = vld [vmem:[%s0 + $0x61c] sm:$0xf]
  %v425 = vld [vmem:[%s0 + $0x620] sm:$0xf]
  %v426 = vld [vmem:[%s0 + $0x624] sm:$0xf]
  %v427 = vld [vmem:[%s0 + $0x628] sm:$0xf]
  %v428 = vld [vmem:[%s0 + $0x62c] sm:$0xf]
  %v429 = vld [vmem:[%s0 + $0x630] sm:$0xf]
  %v430 = vld [vmem:[%s0 + $0x634] sm:$0xf]
  %v431 = vld [vmem:[%s0 + $0x638] sm:$0xf]
  %v432 = vld [vmem:[%s0 + $0x63c] sm:$0xf]
  %v433 = vld [vmem:[%s0 + $0x640] sm:$0xf]
  %v434 = vld [vmem:[%s0 + $0x644] sm:$0xf]
  %v435 = vld [vmem:[%s0 + $0x648] sm:$0xf]
  %v436 = vld [vmem:[%s0 + $0x64c] sm:$0xf]
  %v437 = vld [vmem:[%s0 + $0x650] sm:$0xf]
  %v438 = vld [vmem:[%s0 + $0x654] sm:$0xf]
  %v439 = vld [vmem:[%s0 + $0x658] sm:$0xf]
  %v440 = vld [vmem:[%s0 + $0x65c] sm:$0xf]
  %v441 = vld [vmem:[%s0 + $0x660] sm:$0xf]
  %v442 = vld [vmem:[%s0 + $0x664] sm:$0xf]
  %v443 = vld [vmem:[%s0 + $0x668] sm:$0xf]
  %v444 = vld [vmem:[%s0 + $0x66c] sm:$0xf]
  %v445 = vld [vmem:[%s0 + $0x670] sm:$0xf]
  %v446 = vld [vmem:[%s0 + $0x674] sm:$0xf]
  %v447 = vld [vmem:[%s0 + $0x678] sm:$0xf]
  %v448 = vld [vmem:[%s0 + $0x67c] sm:$0xf]
  %v449 = vld [vmem:[%s0 + $0x680] sm:$0xf]
  %v450 = vld [vmem:[%s0 + $0x684] sm:$0xf]
  %v451 = vld [vmem:[%s0 + $0x688] sm:$0xf]
  %v452 = vld [vmem:[%s0 + $0x68c] sm:$0xf]
  %v453 = vld [vmem:[%s0 + $0x690] sm:$0xf]
  %v454 = vld [vmem:[%s0 + $0x694] sm:$0xf]
  %v455 = vld [vmem:[%s0 + $0x698] sm:$0xf]
  %v456 = vld [vmem:[%s0 + $0x69c] sm:$0xf]
  %v457 = vld [vmem:[%s0 + $0x6a0] sm:$0xf]
  %v458 = vld [vmem:[%s0 + $0x6a4] sm:$0xf]
  %v459 = vld [vmem:[%s0 + $0x6a8] sm:$0xf]
  %v460 = vld [vmem:[%s0 + $0x6ac] sm:$0xf]
  %v461 = vld [vmem:[%s0 + $0x6b0] sm:$0xf]
  %v462 = vld [vmem:[%s0 + $0x6b4] sm:$0xf]
  %v463 = vld [vmem:[%s0 + $0x6b8] sm:$0xf]
  %v464 = vld [vmem:[%s0 + $0x6bc] sm:$0xf]
  %v465 = vld [vmem:[%s0 + $0x6c0] sm:$0xf]
  %v466 = vld [vmem:[%s0 + $0x6c4] sm:$0xf]
  %v467 = vld [vmem:[%s0 + $0x6c8] sm:$0xf]
  %v468 = vld [vmem:[%s0 + $0x6cc] sm:$0xf]
  %v469 = vld [vmem:[%s0 + $0x6d0] sm:$0xf]
  %v470 = vld [vmem:[%s0 + $0x6d4] sm:$0xf]
  %v471 = vld [vmem:[%s0 + $0x6d8] sm:$0xf]
  %v472 = vld [vmem:[%s0 + $0x6dc] sm:$0xf]
  %v473 = vld [vmem:[%s0 + $0x6e0] sm:$0xf]
  %v474 = vld [vmem:[%s0 + $0x6e4] sm:$0xf]
  %v475 = vld [vmem:[%s0 + $0x6e8] sm:$0xf]
  %v476 = vld [vmem:[%s0 + $0x6ec] sm:$0xf]
  %v477 = vld [vmem:[%s0 + $0x6f0] sm:$0xf]
  %v478 = vld [vmem:[%s0 + $0x6f4] sm:$0xf]
  %v479 = vld [vmem:[%s0 + $0x6f8] sm:$0xf]
  %v480 = vld [vmem:[%s0 + $0x6fc] sm:$0xf]
  %v481 = vld [vmem:[%s0 + $0x700] sm:$0xf]
  %v482 = vld [vmem:[%s0 + $0x704] sm:$0xf]
  %v483 = vld [vmem:[%s0 + $0x708] sm:$0xf]
  %v484 = vld [vmem:[%s0 + $0x70c] sm:$0xf]
  %v485 = vld [vmem:[%s0 + $0x710] sm:$0xf]
  %v486 = vld [vmem:[%s0 + $0x714] sm:$0xf]
  %v487 = vld [vmem:[%s0 + $0x718] sm:$0xf]
  %v488 = vld [vmem:[%s0 + $0x71c] sm:$0xf]
  %v489 = vld [vmem:[%s0 + $0x720] sm:$0xf]
  %v490 = vld [vmem:[%s0 + $0x724] sm:$0xf]
  %v491 = vld [vmem:[%s0 + $0x728] sm:$0xf]
  %v492 = vld [vmem:[%s0 + $0x72c] sm:$0xf]
  %v493 = vld [vmem:[%s0 + $0x730] sm:$0xf]
  %v494 = vld [vmem:[%s0 + $0x734] sm:$0xf]
  %v495 = vld [vmem:[%s0 + $0x738] sm:$0xf]
  %v496 = vld [vmem:[%s0 + $0x73c] sm:$0xf]
  %v497 = vld [vmem:[%s0 + $0x740] sm:$0xf]
  %v498 = vld [vmem:[%s0 + $0x744] sm:$0xf]
  %v499 = vld [vmem:[%s0 + $0x748] sm:$0xf]
  %v500 = vld [vmem:[%s0 + $0x74c] sm:$0xf]
  %v501 = vld [vmem:[%s0 + $0x750] sm:$0xf]
  %v502 = vld [vmem:[%s0 + $0x754] sm:$0xf]
  %v503 = vld [vmem:[%s0 + $0x758] sm:$0xf]
  %v504 = vld [vmem:[%s0 + $0x75c] sm:$0xf]
  %v505 = vld [vmem:[%s0 + $0x760] sm:$0xf]
  %v506 = vld [vmem:[%s0 + $0x764] sm:$0xf]
  %v507 = vld [vmem:[%s0 + $0x768] sm:$0xf]
  %v508 = vld [vmem:[%s0 + $0x76c] sm:$0xf]
  %v509 = vld [vmem:[%s0 + $0x770] sm:$0xf]
  %v510 = vld [vmem:[%s0 + $0x774] sm:$0xf]
  %v511 = vld [vmem:[%s0 + $0x778] sm:$0xf]
  %v512 = vld [vmem:[%s0 + $0x77c] sm:$0xf]
  %v513 = vld [vmem:[%s0 + $0x780] sm:$0xf]
  %v514 = vld [vmem:[%s0 + $0x784] sm:$0xf]
  %v515 = vld [vmem:[%s0 + $0x788] sm:$0xf]
  %v516 = vld [vmem:[%s0 + $0x78c] sm:$0xf]
  %v517 = vld [vmem:[%s0 + $0x790] sm:$0xf]
  %v518 = vld [vmem:[%s0 + $0x794] sm:$0xf]
  %v519 = vld [vmem:[%s0 + $0x798] sm:$0xf]
  %v520 = vld [vmem:[%s0 + $0x79c] sm:$0xf]
  %v521 = vld [vmem:[%s0 + $0x7a0] sm:$0xf]
  %v522 = vld [vmem:[%s0 + $0x7a4] sm:$0xf]
  %v523 = vld [vmem:[%s0 + $0x7a8] sm:$0xf]
  %v524 = vld [vmem:[%s0 + $0x7ac] sm:$0xf]
  %v525 = vld [vmem:[%s0 + $0x7b0] sm:$0xf]
  %v526 = vld [vmem:[%s0 + $0x7b4] sm:$0xf]
  %v527 = vld [vmem:[%s0 + $0x7b8] sm:$0xf]
  %v528 = vld [vmem:[%s0 + $0x7bc] sm:$0xf]
  %v529 = vld [vmem:[%s0 + $0x7c0] sm:$0xf]
  %v530 = vld [vmem:[%s0 + $0x7c4] sm:$0xf]
  %v531 = vld [vmem:[%s0 + $0x7c8] sm:$0xf]
  %v532 = vld [vmem:[%s0 + $0x7cc] sm:$0xf]
  %v533 = vld [vmem:[%s0 + $0x7d0] sm:$0xf]
  %v534 = vld [vmem:[%s0 + $0x7d4] sm:$0xf]
  %v535 = vld [vmem:[%s0 + $0x7d8] sm:$0xf]
  %v536 = vld [vmem:[%s0 + $0x7dc] sm:$0xf]
  %v537 = vld [vmem:[%s0 + $0x7e0] sm:$0xf]
  %v538 = vld [vmem:[%s0 + $0x7e4] sm:$0xf]
  %v539 = vld [vmem:[%s0 + $0x7e8] sm:$0xf]
  %v540 = vld [vmem:[%s0 + $0x7ec] sm:$0xf]
  %v541 = vld [vmem:[%s0 + $0x7f0] sm:$0xf]
  %v542 = vld [vmem:[%s0 + $0x7f4] sm:$0xf]
  %v543 = vld [vmem:[%s0 + $0x7f8] sm:$0xf]
  %v544 = vld [vmem:[%s0 + $0x7fc] sm:$0xf]
  %v545 = vld [vmem:[%s0 + $0x800] sm:$0xf]
  %v546 = vld [vmem:[%s0 + $0x804] sm:$0xf]
  %v547 = vld [vmem:[%s0 + $0x808] sm:$0xf]
  %v548 = vld [vmem:[%s0 + $0x80c] sm:$0xf]
  %v549 = vld [vmem:[%s0 + $0x810] sm:$0xf]
  %v550 = vld [vmem:[%s0 + $0x814] sm:$0xf]
  %v551 = vld [vmem:[%s0 + $0x818] sm:$0xf]
  %v552 = vld [vmem:[%s0 + $0x81c] sm:$0xf]
  %v553 = vld [vmem:[%s0 + $0x820] sm:$0xf]
  %v554 = vld [vmem:[%s0 + $0x824] sm:$0xf]
  %v555 = vld [vmem:[%s0 + $0x828] sm:$0xf]
  %v556 = vld [vmem:[%s0 + $0x82c] sm:$0xf]
  %v557 = vld [vmem:[%s0 + $0x830] sm:$0xf]
  %v558 = vld [vmem:[%s0 + $0x834] sm:$0xf]
  %v559 = vld [vmem:[%s0 + $0x838] sm:$0xf]
  %v560 = vld [vmem:[%s0 + $0x83c] sm:$0xf]
  %v561 = vld [vmem:[%s0 + $0x840] sm:$0xf]
  %v562 = vld [vmem:[%s0 + $0x844] sm:$0xf]
  %v563 = vld [vmem:[%s0 + $0x848] sm:$0xf]
  %v564 = vld [vmem:[%s0 + $0x84c] sm:$0xf]
  %v565 = vld [vmem:[%s0 + $0x850] sm:$0xf]
  %v566 = vld [vmem:[%s0 + $0x854] sm:$0xf]
  %v567 = vld [vmem:[%s0 + $0x858] sm:$0xf]
  %v568 = vld [vmem:[%s0 + $0x85c] sm:$0xf]
  %v569 = vld [vmem:[%s0 + $0x860] sm:$0xf]
  %v570 = vld [vmem:[%s0 + $0x864] sm:$0xf]
  %v571 = vld [vmem:[%s0 + $0x868] sm:$0xf]
  %v572 = vld [vmem:[%s0 + $0x86c] sm:$0xf]
  %v573 = vld [vmem:[%s0 + $0x870] sm:$0xf]
  %v574 = vld [vmem:[%s0 + $0x874] sm:$0xf]
  %v575 = vld [vmem:[%s0 + $0x878] sm:$0xf]
  %v576 = vld [vmem:[%s0 + $0x87c] sm:$0xf]
  %v577 = vld [vmem:[%s0 + $0x880] sm:$0xf]
  %v578 = vld [vmem:[%s0 + $0x884] sm:$0xf]
  %v579 = vld [vmem:[%s0 + $0x888] sm:$0xf]
  %v580 = vld [vmem:[%s0 + $0x88c] sm:$0xf]
  %v581 = vld [vmem:[%s0 + $0x890] sm:$0xf]
  %v582 = vld [vmem:[%s0 + $0x894] sm:$0xf]
  %v583 = vld [vmem:[%s0 + $0x898] sm:$0xf]
  %v584 = vld [vmem:[%s0 + $0x89c] sm:$0xf]
  %v585 = vld [vmem:[%s0 + $0x8a0] sm:$0xf]
  %v586 = vld [vmem:[%s0 + $0x8a4] sm:$0xf]
  %v587 = vld [vmem:[%s0 + $0x8a8] sm:$0xf]
  %v588 = vld [vmem:[%s0 + $0x8ac] sm:$0xf]
  %v589 = vld [vmem:[%s0 + $0x8b0] sm:$0xf]
  %v590 = vld [vmem:[%s0 + $0x8b4] sm:$0xf]
  %v591 = vld [vmem:[%s0 + $0x8b8] sm:$0xf]
  %v592 = vld [vmem:[%s0 + $0x8bc] sm:$0xf]
  %v593 = vld [vmem:[%s0 + $0x8c0] sm:$0xf]
  %v594 = vld [vmem:[%s0 + $0x8c4] sm:$0xf]
  %v595 = vld [vmem:[%s0 + $0x8c8] sm:$0xf]
  %v596 = vld [vmem:[%s0 + $0x8cc] sm:$0xf]
  %v597 = vld [vmem:[%s0 + $0x8d0] sm:$0xf]
  %v598 = vld [vmem:[%s0 + $0x8d4] sm:$0xf]
  %v599 = vld [vmem:[%s0 + $0x8d8] sm:$0xf]
  %v600 = vld [vmem:[%s0 + $0x8dc] sm:$0xf]
  %v601 = vld [vmem:[%s0 + $0x8e0] sm:$0xf]
  %v602 = vld [vmem:[%s0 + $0x8e4] sm:$0xf]
  %v603 = vld [vmem:[%s0 + $0x8e8] sm:$0xf]
  %v604 = vld [vmem:[%s0 + $0x8ec] sm:$0xf]
  %v605 = vld [vmem:[%s0 + $0x8f0] sm:$0xf]
  %v606 = vld [vmem:[%s0 + $0x8f4] sm:$0xf]
  %v607 = vld [vmem:[%s0 + $0x8f8] sm:$0xf]
  %v608 = vld [vmem:[%s0 + $0x8fc] sm:$0xf]
  %v609 = vld [vmem:[%s1] sm:$0xf]
  %v610 = vld [vmem:[%s1 + $0x4] sm:$0xf]
  %v611 = vld [vmem:[%s1 + $0x8] sm:$0xf]
  %v612 = vld [vmem:[%s1 + $0xc] sm:$0x1]
  %v613 = vld [vmem:[%s2] sm:$0x1]
  %v615 = vlaneseq
  %v616 = vshrl.u32 %v615, 7
  %v617 = vsub.s32 0, %v616
  %v618 = vrot.slane %v613, %v617
  %v1196 = vunpack.c.l.b16 %v33
  %v1197 = vunpack.c.l.b16 %v34
  %v1198 = vunpack.c.l.b16 %v35
  %v1199 = vunpack.c.l.b16 %v36
  %v1200 = vunpack.c.l.b16 %v37
  %v1201 = vunpack.c.l.b16 %v38
  %v1202 = vunpack.c.l.b16 %v39
  %v1203 = vunpack.c.l.b16 %v40
  %v1204 = vunpack.c.l.b16 %v41
  %v1205 = vunpack.c.l.b16 %v42
  %v1206 = vunpack.c.l.b16 %v43
  %v1207 = vunpack.c.l.b16 %v44
  %v1208 = vunpack.c.l.b16 %v45
  %v1209 = vunpack.c.l.b16 %v46
  %v1210 = vunpack.c.l.b16 %v47
  %v1211 = vunpack.c.l.b16 %v48
  %v1212 = vunpack.c.l.b16 %v49
  %v1213 = vunpack.c.l.b16 %v50
  %v1214 = vunpack.c.l.b16 %v51
  %v1215 = vunpack.c.l.b16 %v52
  %v1216 = vunpack.c.l.b16 %v53
  %v1217 = vunpack.c.l.b16 %v54
  %v1218 = vunpack.c.l.b16 %v55
  %v1219 = vunpack.c.l.b16 %v56
  %v1220 = vunpack.c.l.b16 %v57
  %v1221 = vunpack.c.l.b16 %v58
  %v1222 = vunpack.c.l.b16 %v59
  %v1223 = vunpack.c.l.b16 %v60
  %v1224 = vunpack.c.l.b16 %v61
  %v1225 = vunpack.c.l.b16 %v62
  %v1226 = vunpack.c.l.b16 %v63
  %v1227 = vunpack.c.l.b16 %v64
  %v1228 = vunpack.c.l.b16 %v65
  %v1229 = vunpack.c.l.b16 %v66
  %v1230 = vunpack.c.l.b16 %v67
  %v1231 = vunpack.c.l.b16 %v68
  %v1232 = vunpack.c.l.b16 %v69
  %v1233 = vunpack.c.l.b16 %v70
  %v1234 = vunpack.c.l.b16 %v71
  %v1235 = vunpack.c.l.b16 %v72
  %v1236 = vunpack.c.l.b16 %v73
  %v1237 = vunpack.c.l.b16 %v74
  %v1238 = vunpack.c.l.b16 %v75
  %v1239 = vunpack.c.l.b16 %v76
  %v1240 = vunpack.c.l.b16 %v77
  %v1241 = vunpack.c.l.b16 %v78
  %v1242 = vunpack.c.l.b16 %v79
  %v1243 = vunpack.c.l.b16 %v80
  %v1244 = vunpack.c.l.b16 %v81
  %v1245 = vunpack.c.l.b16 %v82
  %v1246 = vunpack.c.l.b16 %v83
  %v1247 = vunpack.c.l.b16 %v84
  %v1248 = vunpack.c.l.b16 %v85
  %v1249 = vunpack.c.l.b16 %v86
  %v1250 = vunpack.c.l.b16 %v87
  %v1251 = vunpack.c.l.b16 %v88
  %v1252 = vunpack.c.l.b16 %v89
  %v1253 = vunpack.c.l.b16 %v90
  %v1254 = vunpack.c.l.b16 %v91
  %v1255 = vunpack.c.l.b16 %v92
  %v1256 = vunpack.c.l.b16 %v93
  %v1257 = vunpack.c.l.b16 %v94
  %v1258 = vunpack.c.l.b16 %v95
  %v1259 = vunpack.c.l.b16 %v96
  %v1260 = vunpack.c.l.b16 %v97
  %v1261 = vunpack.c.l.b16 %v98
  %v1262 = vunpack.c.l.b16 %v99
  %v1263 = vunpack.c.l.b16 %v100
  %v1264 = vunpack.c.l.b16 %v101
  %v1265 = vunpack.c.l.b16 %v102
  %v1266 = vunpack.c.l.b16 %v103
  %v1267 = vunpack.c.l.b16 %v104
  %v1268 = vunpack.c.l.b16 %v105
  %v1269 = vunpack.c.l.b16 %v106
  %v1270 = vunpack.c.l.b16 %v107
  %v1271 = vunpack.c.l.b16 %v108
  %v1272 = vunpack.c.l.b16 %v109
  %v1273 = vunpack.c.l.b16 %v110
  %v1274 = vunpack.c.l.b16 %v111
  %v1275 = vunpack.c.l.b16 %v112
  %v1276 = vunpack.c.l.b16 %v113
  %v1277 = vunpack.c.l.b16 %v114
  %v1278 = vunpack.c.l.b16 %v115
  %v1279 = vunpack.c.l.b16 %v116
  %v1280 = vunpack.c.l.b16 %v117
  %v1281 = vunpack.c.l.b16 %v118
  %v1282 = vunpack.c.l.b16 %v119
  %v1283 = vunpack.c.l.b16 %v120
  %v1284 = vunpack.c.l.b16 %v121
  %v1285 = vunpack.c.l.b16 %v122
  %v1286 = vunpack.c.l.b16 %v123
  %v1287 = vunpack.c.l.b16 %v124
  %v1288 = vunpack.c.l.b16 %v125
  %v1289 = vunpack.c.l.b16 %v126
  %v1290 = vunpack.c.l.b16 %v127
  %v1291 = vunpack.c.l.b16 %v128
  %v1292 = vunpack.c.l.b16 %v129
  %v1293 = vunpack.c.l.b16 %v130
  %v1294 = vunpack.c.l.b16 %v131
  %v1295 = vunpack.c.l.b16 %v132
  %v1296 = vunpack.c.l.b16 %v133
  %v1297 = vunpack.c.l.b16 %v134
  %v1298 = vunpack.c.l.b16 %v135
  %v1299 = vunpack.c.l.b16 %v136
  %v1300 = vunpack.c.l.b16 %v137
  %v1301 = vunpack.c.l.b16 %v138
  %v1302 = vunpack.c.l.b16 %v139
  %v1303 = vunpack.c.l.b16 %v140
  %v1304 = vunpack.c.l.b16 %v141
  %v1305 = vunpack.c.l.b16 %v142
  %v1306 = vunpack.c.l.b16 %v143
  %v1307 = vunpack.c.l.b16 %v144
  %v1308 = vunpack.c.l.b16 %v145
  %v1309 = vunpack.c.l.b16 %v146
  %v1310 = vunpack.c.l.b16 %v147
  %v1311 = vunpack.c.l.b16 %v148
  %v1312 = vunpack.c.l.b16 %v149
  %v1313 = vunpack.c.l.b16 %v150
  %v1314 = vunpack.c.l.b16 %v151
  %v1315 = vunpack.c.l.b16 %v152
  %v1316 = vunpack.c.l.b16 %v153
  %v1317 = vunpack.c.l.b16 %v154
  %v1318 = vunpack.c.l.b16 %v155
  %v1319 = vunpack.c.l.b16 %v156
  %v1320 = vunpack.c.l.b16 %v157
  %v1321 = vunpack.c.l.b16 %v158
  %v1322 = vunpack.c.l.b16 %v159
  %v1323 = vunpack.c.l.b16 %v160
  %v1324 = vunpack.c.l.b16 %v161
  %v1325 = vunpack.c.l.b16 %v162
  %v1326 = vunpack.c.l.b16 %v163
  %v1327 = vunpack.c.l.b16 %v164
  %v1328 = vunpack.c.l.b16 %v165
  %v1329 = vunpack.c.l.b16 %v166
  %v1330 = vunpack.c.l.b16 %v167
  %v1331 = vunpack.c.l.b16 %v168
  %v1332 = vunpack.c.l.b16 %v169
  %v1333 = vunpack.c.l.b16 %v170
  %v1334 = vunpack.c.l.b16 %v171
  %v1335 = vunpack.c.l.b16 %v172
  %v1336 = vunpack.c.l.b16 %v173
  %v1337 = vunpack.c.l.b16 %v174
  %v1338 = vunpack.c.l.b16 %v175
  %v1339 = vunpack.c.l.b16 %v176
  %v1340 = vunpack.c.l.b16 %v177
  %v1341 = vunpack.c.l.b16 %v178
  %v1342 = vunpack.c.l.b16 %v179
  %v1343 = vunpack.c.l.b16 %v180
  %v1344 = vunpack.c.l.b16 %v181
  %v1345 = vunpack.c.l.b16 %v182
  %v1346 = vunpack.c.l.b16 %v183
  %v1347 = vunpack.c.l.b16 %v184
  %v1348 = vunpack.c.l.b16 %v185
  %v1349 = vunpack.c.l.b16 %v186
  %v1350 = vunpack.c.l.b16 %v187
  %v1351 = vunpack.c.l.b16 %v188
  %v1352 = vunpack.c.l.b16 %v189
  %v1353 = vunpack.c.l.b16 %v190
  %v1354 = vunpack.c.l.b16 %v191
  %v1355 = vunpack.c.l.b16 %v192
  %v1356 = vunpack.c.l.b16 %v193
  %v1357 = vunpack.c.l.b16 %v194
  %v1358 = vunpack.c.l.b16 %v195
  %v1359 = vunpack.c.l.b16 %v196
  %v1360 = vunpack.c.l.b16 %v197
  %v1361 = vunpack.c.l.b16 %v198
  %v1362 = vunpack.c.l.b16 %v199
  %v1363 = vunpack.c.l.b16 %v200
  %v1364 = vunpack.c.l.b16 %v201
  %v1365 = vunpack.c.l.b16 %v202
  %v1366 = vunpack.c.l.b16 %v203
  %v1367 = vunpack.c.l.b16 %v204
  %v1368 = vunpack.c.l.b16 %v205
  %v1369 = vunpack.c.l.b16 %v206
  %v1370 = vunpack.c.l.b16 %v207
  %v1371 = vunpack.c.l.b16 %v208
  %v1372 = vunpack.c.l.b16 %v209
  %v1373 = vunpack.c.l.b16 %v210
  %v1374 = vunpack.c.l.b16 %v211
  %v1375 = vunpack.c.l.b16 %v212
  %v1376 = vunpack.c.l.b16 %v213
  %v1377 = vunpack.c.l.b16 %v214
  %v1378 = vunpack.c.l.b16 %v215
  %v1379 = vunpack.c.l.b16 %v216
  %v1380 = vunpack.c.l.b16 %v217
  %v1381 = vunpack.c.l.b16 %v218
  %v1382 = vunpack.c.l.b16 %v219
  %v1383 = vunpack.c.l.b16 %v220
  %v1384 = vunpack.c.l.b16 %v221
  %v1385 = vunpack.c.l.b16 %v222
  %v1386 = vunpack.c.l.b16 %v223
  %v1387 = vunpack.c.l.b16 %v224
  %v1388 = vunpack.c.l.b16 %v225
  %v1389 = vunpack.c.l.b16 %v226
  %v1390 = vunpack.c.l.b16 %v227
  %v1391 = vunpack.c.l.b16 %v228
  %v1392 = vunpack.c.l.b16 %v229
  %v1393 = vunpack.c.l.b16 %v230
  %v1394 = vunpack.c.l.b16 %v231
  %v1395 = vunpack.c.l.b16 %v232
  %v1396 = vunpack.c.l.b16 %v233
  %v1397 = vunpack.c.l.b16 %v234
  %v1398 = vunpack.c.l.b16 %v235
  %v1399 = vunpack.c.l.b16 %v236
  %v1400 = vunpack.c.l.b16 %v237
  %v1401 = vunpack.c.l.b16 %v238
  %v1402 = vunpack.c.l.b16 %v239
  %v1403 = vunpack.c.l.b16 %v240
  %v1404 = vunpack.c.l.b16 %v241
  %v1405 = vunpack.c.l.b16 %v242
  %v1406 = vunpack.c.l.b16 %v243
  %v1407 = vunpack.c.l.b16 %v244
  %v1408 = vunpack.c.l.b16 %v245
  %v1409 = vunpack.c.l.b16 %v246
  %v1410 = vunpack.c.l.b16 %v247
  %v1411 = vunpack.c.l.b16 %v248
  %v1412 = vunpack.c.l.b16 %v249
  %v1413 = vunpack.c.l.b16 %v250
  %v1414 = vunpack.c.l.b16 %v251
  %v1415 = vunpack.c.l.b16 %v252
  %v1416 = vunpack.c.l.b16 %v253
  %v1417 = vunpack.c.l.b16 %v254
  %v1418 = vunpack.c.l.b16 %v255
  %v1419 = vunpack.c.l.b16 %v256
  %v1420 = vunpack.c.l.b16 %v257
  %v1421 = vunpack.c.l.b16 %v258
  %v1422 = vunpack.c.l.b16 %v259
  %v1423 = vunpack.c.l.b16 %v260
  %v1424 = vunpack.c.l.b16 %v261
  %v1425 = vunpack.c.l.b16 %v262
  %v1426 = vunpack.c.l.b16 %v263
  %v1427 = vunpack.c.l.b16 %v264
  %v1428 = vunpack.c.l.b16 %v265
  %v1429 = vunpack.c.l.b16 %v266
  %v1430 = vunpack.c.l.b16 %v267
  %v1431 = vunpack.c.l.b16 %v268
  %v1432 = vunpack.c.l.b16 %v269
  %v1433 = vunpack.c.l.b16 %v270
  %v1434 = vunpack.c.l.b16 %v271
  %v1435 = vunpack.c.l.b16 %v272
  %v1436 = vunpack.c.l.b16 %v273
  %v1437 = vunpack.c.l.b16 %v274
  %v1438 = vunpack.c.l.b16 %v275
  %v1439 = vunpack.c.l.b16 %v276
  %v1440 = vunpack.c.l.b16 %v277
  %v1441 = vunpack.c.l.b16 %v278
  %v1442 = vunpack.c.l.b16 %v279
  %v1443 = vunpack.c.l.b16 %v280
  %v1444 = vunpack.c.l.b16 %v281
  %v1445 = vunpack.c.l.b16 %v282
  %v1446 = vunpack.c.l.b16 %v283
  %v1447 = vunpack.c.l.b16 %v284
  %v1448 = vunpack.c.l.b16 %v285
  %v1449 = vunpack.c.l.b16 %v286
  %v1450 = vunpack.c.l.b16 %v287
  %v1451 = vunpack.c.l.b16 %v288
  %v1452 = vunpack.c.l.b16 %v289
  %v1453 = vunpack.c.l.b16 %v290
  %v1454 = vunpack.c.l.b16 %v291
  %v1455 = vunpack.c.l.b16 %v292
  %v1456 = vunpack.c.l.b16 %v293
  %v1457 = vunpack.c.l.b16 %v294
  %v1458 = vunpack.c.l.b16 %v295
  %v1459 = vunpack.c.l.b16 %v296
  %v1460 = vunpack.c.l.b16 %v297
  %v1461 = vunpack.c.l.b16 %v298
  %v1462 = vunpack.c.l.b16 %v299
  %v1463 = vunpack.c.l.b16 %v300
  %v1464 = vunpack.c.l.b16 %v301
  %v1465 = vunpack.c.l.b16 %v302
  %v1466 = vunpack.c.l.b16 %v303
  %v1467 = vunpack.c.l.b16 %v304
  %v1468 = vunpack.c.l.b16 %v305
  %v1469 = vunpack.c.l.b16 %v306
  %v1470 = vunpack.c.l.b16 %v307
  %v1471 = vunpack.c.l.b16 %v308
  %v1472 = vunpack.c.l.b16 %v309
  %v1473 = vunpack.c.l.b16 %v310
  %v1474 = vunpack.c.l.b16 %v311
  %v1475 = vunpack.c.l.b16 %v312
  %v1476 = vunpack.c.l.b16 %v313
  %v1477 = vunpack.c.l.b16 %v314
  %v1478 = vunpack.c.l.b16 %v315
  %v1479 = vunpack.c.l.b16 %v316
  %v1480 = vunpack.c.l.b16 %v317
  %v1481 = vunpack.c.l.b16 %v318
  %v1482 = vunpack.c.l.b16 %v319
  %v1483 = vunpack.c.l.b16 %v320
  %v1484 = vunpack.c.l.b16 %v321
  %v1485 = vunpack.c.l.b16 %v322
  %v1486 = vunpack.c.l.b16 %v323
  %v1487 = vunpack.c.l.b16 %v324
  %v1488 = vunpack.c.l.b16 %v325
  %v1489 = vunpack.c.l.b16 %v326
  %v1490 = vunpack.c.l.b16 %v327
  %v1491 = vunpack.c.l.b16 %v328
  %v1492 = vunpack.c.l.b16 %v329
  %v1493 = vunpack.c.l.b16 %v330
  %v1494 = vunpack.c.l.b16 %v331
  %v1495 = vunpack.c.l.b16 %v332
  %v1496 = vunpack.c.l.b16 %v333
  %v1497 = vunpack.c.l.b16 %v334
  %v1498 = vunpack.c.l.b16 %v335
  %v1499 = vunpack.c.l.b16 %v336
  %v1500 = vunpack.c.l.b16 %v337
  %v1501 = vunpack.c.l.b16 %v338
  %v1502 = vunpack.c.l.b16 %v339
  %v1503 = vunpack.c.l.b16 %v340
  %v1504 = vunpack.c.l.b16 %v341
  %v1505 = vunpack.c.l.b16 %v342
  %v1506 = vunpack.c.l.b16 %v343
  %v1507 = vunpack.c.l.b16 %v344
  %v1508 = vunpack.c.l.b16 %v345
  %v1509 = vunpack.c.l.b16 %v346
  %v1510 = vunpack.c.l.b16 %v347
  %v1511 = vunpack.c.l.b16 %v348
  %v1512 = vunpack.c.l.b16 %v349
  %v1513 = vunpack.c.l.b16 %v350
  %v1514 = vunpack.c.l.b16 %v351
  %v1515 = vunpack.c.l.b16 %v352
  %v1516 = vunpack.c.l.b16 %v353
  %v1517 = vunpack.c.l.b16 %v354
  %v1518 = vunpack.c.l.b16 %v355
  %v1519 = vunpack.c.l.b16 %v356
  %v1520 = vunpack.c.l.b16 %v357
  %v1521 = vunpack.c.l.b16 %v358
  %v1522 = vunpack.c.l.b16 %v359
  %v1523 = vunpack.c.l.b16 %v360
  %v1524 = vunpack.c.l.b16 %v361
  %v1525 = vunpack.c.l.b16 %v362
  %v1526 = vunpack.c.l.b16 %v363
  %v1527 = vunpack.c.l.b16 %v364
  %v1528 = vunpack.c.l.b16 %v365
  %v1529 = vunpack.c.l.b16 %v366
  %v1530 = vunpack.c.l.b16 %v367
  %v1531 = vunpack.c.l.b16 %v368
  %v1532 = vunpack.c.l.b16 %v369
  %v1533 = vunpack.c.l.b16 %v370
  %v1534 = vunpack.c.l.b16 %v371
  %v1535 = vunpack.c.l.b16 %v372
  %v1536 = vunpack.c.l.b16 %v373
  %v1537 = vunpack.c.l.b16 %v374
  %v1538 = vunpack.c.l.b16 %v375
  %v1539 = vunpack.c.l.b16 %v376
  %v1540 = vunpack.c.l.b16 %v377
  %v1541 = vunpack.c.l.b16 %v378
  %v1542 = vunpack.c.l.b16 %v379
  %v1543 = vunpack.c.l.b16 %v380
  %v1544 = vunpack.c.l.b16 %v381
  %v1545 = vunpack.c.l.b16 %v382
  %v1546 = vunpack.c.l.b16 %v383
  %v1547 = vunpack.c.l.b16 %v384
  %v1548 = vunpack.c.l.b16 %v385
  %v1549 = vunpack.c.l.b16 %v386
  %v1550 = vunpack.c.l.b16 %v387
  %v1551 = vunpack.c.l.b16 %v388
  %v1552 = vunpack.c.l.b16 %v389
  %v1553 = vunpack.c.l.b16 %v390
  %v1554 = vunpack.c.l.b16 %v391
  %v1555 = vunpack.c.l.b16 %v392
  %v1556 = vunpack.c.l.b16 %v393
  %v1557 = vunpack.c.l.b16 %v394
  %v1558 = vunpack.c.l.b16 %v395
  %v1559 = vunpack.c.l.b16 %v396
  %v1560 = vunpack.c.l.b16 %v397
  %v1561 = vunpack.c.l.b16 %v398
  %v1562 = vunpack.c.l.b16 %v399
  %v1563 = vunpack.c.l.b16 %v400
  %v1564 = vunpack.c.l.b16 %v401
  %v1565 = vunpack.c.l.b16 %v402
  %v1566 = vunpack.c.l.b16 %v403
  %v1567 = vunpack.c.l.b16 %v404
  %v1568 = vunpack.c.l.b16 %v405
  %v1569 = vunpack.c.l.b16 %v406
  %v1570 = vunpack.c.l.b16 %v407
  %v1571 = vunpack.c.l.b16 %v408
  %v1572 = vunpack.c.l.b16 %v409
  %v1573 = vunpack.c.l.b16 %v410
  %v1574 = vunpack.c.l.b16 %v411
  %v1575 = vunpack.c.l.b16 %v412
  %v1576 = vunpack.c.l.b16 %v413
  %v1577 = vunpack.c.l.b16 %v414
  %v1578 = vunpack.c.l.b16 %v415
  %v1579 = vunpack.c.l.b16 %v416
  %v1580 = vunpack.c.l.b16 %v417
  %v1581 = vunpack.c.l.b16 %v418
  %v1582 = vunpack.c.l.b16 %v419
  %v1583 = vunpack.c.l.b16 %v420
  %v1584 = vunpack.c.l.b16 %v421
  %v1585 = vunpack.c.l.b16 %v422
  %v1586 = vunpack.c.l.b16 %v423
  %v1587 = vunpack.c.l.b16 %v424
  %v1588 = vunpack.c.l.b16 %v425
  %v1589 = vunpack.c.l.b16 %v426
  %v1590 = vunpack.c.l.b16 %v427
  %v1591 = vunpack.c.l.b16 %v428
  %v1592 = vunpack.c.l.b16 %v429
  %v1593 = vunpack.c.l.b16 %v430
  %v1594 = vunpack.c.l.b16 %v431
  %v1595 = vunpack.c.l.b16 %v432
  %v1596 = vunpack.c.l.b16 %v433
  %v1597 = vunpack.c.l.b16 %v434
  %v1598 = vunpack.c.l.b16 %v435
  %v1599 = vunpack.c.l.b16 %v436
  %v1600 = vunpack.c.l.b16 %v437
  %v1601 = vunpack.c.l.b16 %v438
  %v1602 = vunpack.c.l.b16 %v439
  %v1603 = vunpack.c.l.b16 %v440
  %v1604 = vunpack.c.l.b16 %v441
  %v1605 = vunpack.c.l.b16 %v442
  %v1606 = vunpack.c.l.b16 %v443
  %v1607 = vunpack.c.l.b16 %v444
  %v1608 = vunpack.c.l.b16 %v445
  %v1609 = vunpack.c.l.b16 %v446
  %v1610 = vunpack.c.l.b16 %v447
  %v1611 = vunpack.c.l.b16 %v448
  %v1612 = vunpack.c.l.b16 %v449
  %v1613 = vunpack.c.l.b16 %v450
  %v1614 = vunpack.c.l.b16 %v451
  %v1615 = vunpack.c.l.b16 %v452
  %v1616 = vunpack.c.l.b16 %v453
  %v1617 = vunpack.c.l.b16 %v454
  %v1618 = vunpack.c.l.b16 %v455
  %v1619 = vunpack.c.l.b16 %v456
  %v1620 = vunpack.c.l.b16 %v457
  %v1621 = vunpack.c.l.b16 %v458
  %v1622 = vunpack.c.l.b16 %v459
  %v1623 = vunpack.c.l.b16 %v460
  %v1624 = vunpack.c.l.b16 %v461
  %v1625 = vunpack.c.l.b16 %v462
  %v1626 = vunpack.c.l.b16 %v463
  %v1627 = vunpack.c.l.b16 %v464
  %v1628 = vunpack.c.l.b16 %v465
  %v1629 = vunpack.c.l.b16 %v466
  %v1630 = vunpack.c.l.b16 %v467
  %v1631 = vunpack.c.l.b16 %v468
  %v1632 = vunpack.c.l.b16 %v469
  %v1633 = vunpack.c.l.b16 %v470
  %v1634 = vunpack.c.l.b16 %v471
  %v1635 = vunpack.c.l.b16 %v472
  %v1636 = vunpack.c.l.b16 %v473
  %v1637 = vunpack.c.l.b16 %v474
  %v1638 = vunpack.c.l.b16 %v475
  %v1639 = vunpack.c.l.b16 %v476
  %v1640 = vunpack.c.l.b16 %v477
  %v1641 = vunpack.c.l.b16 %v478
  %v1642 = vunpack.c.l.b16 %v479
  %v1643 = vunpack.c.l.b16 %v480
  %v1644 = vunpack.c.l.b16 %v481
  %v1645 = vunpack.c.l.b16 %v482
  %v1646 = vunpack.c.l.b16 %v483
  %v1647 = vunpack.c.l.b16 %v484
  %v1648 = vunpack.c.l.b16 %v485
  %v1649 = vunpack.c.l.b16 %v486
  %v1650 = vunpack.c.l.b16 %v487
  %v1651 = vunpack.c.l.b16 %v488
  %v1652 = vunpack.c.l.b16 %v489
  %v1653 = vunpack.c.l.b16 %v490
  %v1654 = vunpack.c.l.b16 %v491
  %v1655 = vunpack.c.l.b16 %v492
  %v1656 = vunpack.c.l.b16 %v493
  %v1657 = vunpack.c.l.b16 %v494
  %v1658 = vunpack.c.l.b16 %v495
  %v1659 = vunpack.c.l.b16 %v496
  %v1660 = vunpack.c.l.b16 %v497
  %v1661 = vunpack.c.l.b16 %v498
  %v1662 = vunpack.c.l.b16 %v499
  %v1663 = vunpack.c.l.b16 %v500
  %v1664 = vunpack.c.l.b16 %v501
  %v1665 = vunpack.c.l.b16 %v502
  %v1666 = vunpack.c.l.b16 %v503
  %v1667 = vunpack.c.l.b16 %v504
  %v1668 = vunpack.c.l.b16 %v505
  %v1669 = vunpack.c.l.b16 %v506
  %v1670 = vunpack.c.l.b16 %v507
  %v1671 = vunpack.c.l.b16 %v508
  %v1672 = vunpack.c.l.b16 %v509
  %v1673 = vunpack.c.l.b16 %v510
  %v1674 = vunpack.c.l.b16 %v511
  %v1675 = vunpack.c.l.b16 %v512
  %v1676 = vunpack.c.l.b16 %v513
  %v1677 = vunpack.c.l.b16 %v514
  %v1678 = vunpack.c.l.b16 %v515
  %v1679 = vunpack.c.l.b16 %v516
  %v1680 = vunpack.c.l.b16 %v517
  %v1681 = vunpack.c.l.b16 %v518
  %v1682 = vunpack.c.l.b16 %v519
  %v1683 = vunpack.c.l.b16 %v520
  %v1684 = vunpack.c.l.b16 %v521
  %v1685 = vunpack.c.l.b16 %v522
  %v1686 = vunpack.c.l.b16 %v523
  %v1687 = vunpack.c.l.b16 %v524
  %v1688 = vunpack.c.l.b16 %v525
  %v1689 = vunpack.c.l.b16 %v526
  %v1690 = vunpack.c.l.b16 %v527
  %v1691 = vunpack.c.l.b16 %v528
  %v1692 = vunpack.c.l.b16 %v529
  %v1693 = vunpack.c.l.b16 %v530
  %v1694 = vunpack.c.l.b16 %v531
  %v1695 = vunpack.c.l.b16 %v532
  %v1696 = vunpack.c.l.b16 %v533
  %v1697 = vunpack.c.l.b16 %v534
  %v1698 = vunpack.c.l.b16 %v535
  %v1699 = vunpack.c.l.b16 %v536
  %v1700 = vunpack.c.l.b16 %v537
  %v1701 = vunpack.c.l.b16 %v538
  %v1702 = vunpack.c.l.b16 %v539
  %v1703 = vunpack.c.l.b16 %v540
  %v1704 = vunpack.c.l.b16 %v541
  %v1705 = vunpack.c.l.b16 %v542
  %v1706 = vunpack.c.l.b16 %v543
  %v1707 = vunpack.c.l.b16 %v544
  %v1708 = vunpack.c.l.b16 %v545
  %v1709 = vunpack.c.l.b16 %v546
  %v1710 = vunpack.c.l.b16 %v547
  %v1711 = vunpack.c.l.b16 %v548
  %v1712 = vunpack.c.l.b16 %v549
  %v1713 = vunpack.c.l.b16 %v550
  %v1714 = vunpack.c.l.b16 %v551
  %v1715 = vunpack.c.l.b16 %v552
  %v1716 = vunpack.c.l.b16 %v553
  %v1717 = vunpack.c.l.b16 %v554
  %v1718 = vunpack.c.l.b16 %v555
  %v1719 = vunpack.c.l.b16 %v556
  %v1720 = vunpack.c.l.b16 %v557
  %v1721 = vunpack.c.l.b16 %v558
  %v1722 = vunpack.c.l.b16 %v559
  %v1723 = vunpack.c.l.b16 %v560
  %v1724 = vunpack.c.l.b16 %v561
  %v1725 = vunpack.c.l.b16 %v562
  %v1726 = vunpack.c.l.b16 %v563
  %v1727 = vunpack.c.l.b16 %v564
  %v1728 = vunpack.c.l.b16 %v565
  %v1729 = vunpack.c.l.b16 %v566
  %v1730 = vunpack.c.l.b16 %v567
  %v1731 = vunpack.c.l.b16 %v568
  %v1732 = vunpack.c.l.b16 %v569
  %v1733 = vunpack.c.l.b16 %v570
  %v1734 = vunpack.c.l.b16 %v571
  %v1735 = vunpack.c.l.b16 %v572
  %v1736 = vunpack.c.l.b16 %v573
  %v1737 = vunpack.c.l.b16 %v574
  %v1738 = vunpack.c.l.b16 %v575
  %v1739 = vunpack.c.l.b16 %v576
  %v1740 = vunpack.c.l.b16 %v577
  %v1741 = vunpack.c.l.b16 %v578
  %v1742 = vunpack.c.l.b16 %v579
  %v1743 = vunpack.c.l.b16 %v580
  %v1744 = vunpack.c.l.b16 %v581
  %v1745 = vunpack.c.l.b16 %v582
  %v1746 = vunpack.c.l.b16 %v583
  %v1747 = vunpack.c.l.b16 %v584
  %v1748 = vunpack.c.l.b16 %v585
  %v1749 = vunpack.c.l.b16 %v586
  %v1750 = vunpack.c.l.b16 %v587
  %v1751 = vunpack.c.l.b16 %v588
  %v1752 = vunpack.c.l.b16 %v589
  %v1753 = vunpack.c.l.b16 %v590
  %v1754 = vunpack.c.l.b16 %v591
  %v1755 = vunpack.c.l.b16 %v592
  %v1756 = vunpack.c.l.b16 %v593
  %v1757 = vunpack.c.l.b16 %v594
  %v1758 = vunpack.c.l.b16 %v595
  %v1759 = vunpack.c.l.b16 %v596
  %v1760 = vunpack.c.l.b16 %v597
  %v1761 = vunpack.c.l.b16 %v598
  %v1762 = vunpack.c.l.b16 %v599
  %v1763 = vunpack.c.l.b16 %v600
  %v1764 = vunpack.c.l.b16 %v601
  %v1765 = vunpack.c.l.b16 %v602
  %v1766 = vunpack.c.l.b16 %v603
  %v1767 = vunpack.c.l.b16 %v604
  %v1768 = vunpack.c.l.b16 %v605
  %v1769 = vunpack.c.l.b16 %v606
  %v1770 = vunpack.c.l.b16 %v607
  %v1771 = vunpack.c.l.b16 %v608
  %v1772 = vpack.c.b16 %v1197, %v1196
  %v1773 = vpack.c.b16 %v1199, %v1198
  %v1774 = vpack.c.b16 %v1201, %v1200
  %v1775 = vpack.c.b16 %v1203, %v1202
  %v1776 = vpack.c.b16 %v1205, %v1204
  %v1777 = vpack.c.b16 %v1207, %v1206
  %v1778 = vpack.c.b16 %v1209, %v1208
  %v1779 = vpack.c.b16 %v1211, %v1210
  %v1780 = vpack.c.b16 %v1213, %v1212
  %v1781 = vpack.c.b16 %v1215, %v1214
  %v1782 = vpack.c.b16 %v1217, %v1216
  %v1783 = vpack.c.b16 %v1219, %v1218
  %v1784 = vpack.c.b16 %v1221, %v1220
  %v1785 = vpack.c.b16 %v1223, %v1222
  %v1786 = vpack.c.b16 %v1225, %v1224
  %v1787 = vpack.c.b16 %v1227, %v1226
  %v1788 = vpack.c.b16 %v1229, %v1228
  %v1789 = vpack.c.b16 %v1231, %v1230
  %v1790 = vpack.c.b16 %v1233, %v1232
  %v1791 = vpack.c.b16 %v1235, %v1234
  %v1792 = vpack.c.b16 %v1237, %v1236
  %v1793 = vpack.c.b16 %v1239, %v1238
  %v1794 = vpack.c.b16 %v1241, %v1240
  %v1795 = vpack.c.b16 %v1243, %v1242
  %v1796 = vpack.c.b16 %v1245, %v1244
  %v1797 = vpack.c.b16 %v1247, %v1246
  %v1798 = vpack.c.b16 %v1249, %v1248
  %v1799 = vpack.c.b16 %v1251, %v1250
  %v1800 = vpack.c.b16 %v1253, %v1252
  %v1801 = vpack.c.b16 %v1255, %v1254
  %v1802 = vpack.c.b16 %v1257, %v1256
  %v1803 = vpack.c.b16 %v1259, %v1258
  %v1804 = vpack.c.b16 %v1261, %v1260
  %v1805 = vpack.c.b16 %v1263, %v1262
  %v1806 = vpack.c.b16 %v1265, %v1264
  %v1807 = vpack.c.b16 %v1267, %v1266
  %v1808 = vpack.c.b16 %v1269, %v1268
  %v1809 = vpack.c.b16 %v1271, %v1270
  %v1810 = vpack.c.b16 %v1273, %v1272
  %v1811 = vpack.c.b16 %v1275, %v1274
  %v1812 = vpack.c.b16 %v1277, %v1276
  %v1813 = vpack.c.b16 %v1279, %v1278
  %v1814 = vpack.c.b16 %v1281, %v1280
  %v1815 = vpack.c.b16 %v1283, %v1282
  %v1816 = vpack.c.b16 %v1285, %v1284
  %v1817 = vpack.c.b16 %v1287, %v1286
  %v1818 = vpack.c.b16 %v1289, %v1288
  %v1819 = vpack.c.b16 %v1291, %v1290
  %v1820 = vpack.c.b16 %v1293, %v1292
  %v1821 = vpack.c.b16 %v1295, %v1294
  %v1822 = vpack.c.b16 %v1297, %v1296
  %v1823 = vpack.c.b16 %v1299, %v1298
  %v1824 = vpack.c.b16 %v1301, %v1300
  %v1825 = vpack.c.b16 %v1303, %v1302
  %v1826 = vpack.c.b16 %v1305, %v1304
  %v1827 = vpack.c.b16 %v1307, %v1306
  %v1828 = vpack.c.b16 %v1309, %v1308
  %v1829 = vpack.c.b16 %v1311, %v1310
  %v1830 = vpack.c.b16 %v1313, %v1312
  %v1831 = vpack.c.b16 %v1315, %v1314
  %v1832 = vpack.c.b16 %v1317, %v1316
  %v1833 = vpack.c.b16 %v1319, %v1318
  %v1834 = vpack.c.b16 %v1321, %v1320
  %v1835 = vpack.c.b16 %v1323, %v1322
  %v1836 = vpack.c.b16 %v1325, %v1324
  %v1837 = vpack.c.b16 %v1327, %v1326
  %v1838 = vpack.c.b16 %v1329, %v1328
  %v1839 = vpack.c.b16 %v1331, %v1330
  %v1840 = vpack.c.b16 %v1333, %v1332
  %v1841 = vpack.c.b16 %v1335, %v1334
  %v1842 = vpack.c.b16 %v1337, %v1336
  %v1843 = vpack.c.b16 %v1339, %v1338
  %v1844 = vpack.c.b16 %v1341, %v1340
  %v1845 = vpack.c.b16 %v1343, %v1342
  %v1846 = vpack.c.b16 %v1345, %v1344
  %v1847 = vpack.c.b16 %v1347, %v1346
  %v1848 = vpack.c.b16 %v1349, %v1348
  %v1849 = vpack.c.b16 %v1351, %v1350
  %v1850 = vpack.c.b16 %v1353, %v1352
  %v1851 = vpack.c.b16 %v1355, %v1354
  %v1852 = vpack.c.b16 %v1357, %v1356
  %v1853 = vpack.c.b16 %v1359, %v1358
  %v1854 = vpack.c.b16 %v1361, %v1360
  %v1855 = vpack.c.b16 %v1363, %v1362
  %v1856 = vpack.c.b16 %v1365, %v1364
  %v1857 = vpack.c.b16 %v1367, %v1366
  %v1858 = vpack.c.b16 %v1369, %v1368
  %v1859 = vpack.c.b16 %v1371, %v1370
  %v1860 = vpack.c.b16 %v1373, %v1372
  %v1861 = vpack.c.b16 %v1375, %v1374
  %v1862 = vpack.c.b16 %v1377, %v1376
  %v1863 = vpack.c.b16 %v1379, %v1378
  %v1864 = vpack.c.b16 %v1381, %v1380
  %v1865 = vpack.c.b16 %v1383, %v1382
  %v1866 = vpack.c.b16 %v1385, %v1384
  %v1867 = vpack.c.b16 %v1387, %v1386
  %v1868 = vpack.c.b16 %v1389, %v1388
  %v1869 = vpack.c.b16 %v1391, %v1390
  %v1870 = vpack.c.b16 %v1393, %v1392
  %v1871 = vpack.c.b16 %v1395, %v1394
  %v1872 = vpack.c.b16 %v1397, %v1396
  %v1873 = vpack.c.b16 %v1399, %v1398
  %v1874 = vpack.c.b16 %v1401, %v1400
  %v1875 = vpack.c.b16 %v1403, %v1402
  %v1876 = vpack.c.b16 %v1405, %v1404
  %v1877 = vpack.c.b16 %v1407, %v1406
  %v1878 = vpack.c.b16 %v1409, %v1408
  %v1879 = vpack.c.b16 %v1411, %v1410
  %v1880 = vpack.c.b16 %v1413, %v1412
  %v1881 = vpack.c.b16 %v1415, %v1414
  %v1882 = vpack.c.b16 %v1417, %v1416
  %v1883 = vpack.c.b16 %v1419, %v1418
  %v1884 = vpack.c.b16 %v1421, %v1420
  %v1885 = vpack.c.b16 %v1423, %v1422
  %v1886 = vpack.c.b16 %v1425, %v1424
  %v1887 = vpack.c.b16 %v1427, %v1426
  %v1888 = vpack.c.b16 %v1429, %v1428
  %v1889 = vpack.c.b16 %v1431, %v1430
  %v1890 = vpack.c.b16 %v1433, %v1432
  %v1891 = vpack.c.b16 %v1435, %v1434
  %v1892 = vpack.c.b16 %v1437, %v1436
  %v1893 = vpack.c.b16 %v1439, %v1438
  %v1894 = vpack.c.b16 %v1441, %v1440
  %v1895 = vpack.c.b16 %v1443, %v1442
  %v1896 = vpack.c.b16 %v1445, %v1444
  %v1897 = vpack.c.b16 %v1447, %v1446
  %v1898 = vpack.c.b16 %v1449, %v1448
  %v1899 = vpack.c.b16 %v1451, %v1450
  %v1900 = vpack.c.b16 %v1453, %v1452
  %v1901 = vpack.c.b16 %v1455, %v1454
  %v1902 = vpack.c.b16 %v1457, %v1456
  %v1903 = vpack.c.b16 %v1459, %v1458
  %v1904 = vpack.c.b16 %v1461, %v1460
  %v1905 = vpack.c.b16 %v1463, %v1462
  %v1906 = vpack.c.b16 %v1465, %v1464
  %v1907 = vpack.c.b16 %v1467, %v1466
  %v1908 = vpack.c.b16 %v1469, %v1468
  %v1909 = vpack.c.b16 %v1471, %v1470
  %v1910 = vpack.c.b16 %v1473, %v1472
  %v1911 = vpack.c.b16 %v1475, %v1474
  %v1912 = vpack.c.b16 %v1477, %v1476
  %v1913 = vpack.c.b16 %v1479, %v1478
  %v1914 = vpack.c.b16 %v1481, %v1480
  %v1915 = vpack.c.b16 %v1483, %v1482
  %v1916 = vpack.c.b16 %v1485, %v1484
  %v1917 = vpack.c.b16 %v1487, %v1486
  %v1918 = vpack.c.b16 %v1489, %v1488
  %v1919 = vpack.c.b16 %v1491, %v1490
  %v1920 = vpack.c.b16 %v1493, %v1492
  %v1921 = vpack.c.b16 %v1495, %v1494
  %v1922 = vpack.c.b16 %v1497, %v1496
  %v1923 = vpack.c.b16 %v1499, %v1498
  %v1924 = vpack.c.b16 %v1501, %v1500
  %v1925 = vpack.c.b16 %v1503, %v1502
  %v1926 = vpack.c.b16 %v1505, %v1504
  %v1927 = vpack.c.b16 %v1507, %v1506
  %v1928 = vpack.c.b16 %v1509, %v1508
  %v1929 = vpack.c.b16 %v1511, %v1510
  %v1930 = vpack.c.b16 %v1513, %v1512
  %v1931 = vpack.c.b16 %v1515, %v1514
  %v1932 = vpack.c.b16 %v1517, %v1516
  %v1933 = vpack.c.b16 %v1519, %v1518
  %v1934 = vpack.c.b16 %v1521, %v1520
  %v1935 = vpack.c.b16 %v1523, %v1522
  %v1936 = vpack.c.b16 %v1525, %v1524
  %v1937 = vpack.c.b16 %v1527, %v1526
  %v1938 = vpack.c.b16 %v1529, %v1528
  %v1939 = vpack.c.b16 %v1531, %v1530
  %v1940 = vpack.c.b16 %v1533, %v1532
  %v1941 = vpack.c.b16 %v1535, %v1534
  %v1942 = vpack.c.b16 %v1537, %v1536
  %v1943 = vpack.c.b16 %v1539, %v1538
  %v1944 = vpack.c.b16 %v1541, %v1540
  %v1945 = vpack.c.b16 %v1543, %v1542
  %v1946 = vpack.c.b16 %v1545, %v1544
  %v1947 = vpack.c.b16 %v1547, %v1546
  %v1948 = vpack.c.b16 %v1549, %v1548
  %v1949 = vpack.c.b16 %v1551, %v1550
  %v1950 = vpack.c.b16 %v1553, %v1552
  %v1951 = vpack.c.b16 %v1555, %v1554
  %v1952 = vpack.c.b16 %v1557, %v1556
  %v1953 = vpack.c.b16 %v1559, %v1558
  %v1954 = vpack.c.b16 %v1561, %v1560
  %v1955 = vpack.c.b16 %v1563, %v1562
  %v1956 = vpack.c.b16 %v1565, %v1564
  %v1957 = vpack.c.b16 %v1567, %v1566
  %v1958 = vpack.c.b16 %v1569, %v1568
  %v1959 = vpack.c.b16 %v1571, %v1570
  %v1960 = vpack.c.b16 %v1573, %v1572
  %v1961 = vpack.c.b16 %v1575, %v1574
  %v1962 = vpack.c.b16 %v1577, %v1576
  %v1963 = vpack.c.b16 %v1579, %v1578
  %v1964 = vpack.c.b16 %v1581, %v1580
  %v1965 = vpack.c.b16 %v1583, %v1582
  %v1966 = vpack.c.b16 %v1585, %v1584
  %v1967 = vpack.c.b16 %v1587, %v1586
  %v1968 = vpack.c.b16 %v1589, %v1588
  %v1969 = vpack.c.b16 %v1591, %v1590
  %v1970 = vpack.c.b16 %v1593, %v1592
  %v1971 = vpack.c.b16 %v1595, %v1594
  %v1972 = vpack.c.b16 %v1597, %v1596
  %v1973 = vpack.c.b16 %v1599, %v1598
  %v1974 = vpack.c.b16 %v1601, %v1600
  %v1975 = vpack.c.b16 %v1603, %v1602
  %v1976 = vpack.c.b16 %v1605, %v1604
  %v1977 = vpack.c.b16 %v1607, %v1606
  %v1978 = vpack.c.b16 %v1609, %v1608
  %v1979 = vpack.c.b16 %v1611, %v1610
  %v1980 = vpack.c.b16 %v1613, %v1612
  %v1981 = vpack.c.b16 %v1615, %v1614
  %v1982 = vpack.c.b16 %v1617, %v1616
  %v1983 = vpack.c.b16 %v1619, %v1618
  %v1984 = vpack.c.b16 %v1621, %v1620
  %v1985 = vpack.c.b16 %v1623, %v1622
  %v1986 = vpack.c.b16 %v1625, %v1624
  %v1987 = vpack.c.b16 %v1627, %v1626
  %v1988 = vpack.c.b16 %v1629, %v1628
  %v1989 = vpack.c.b16 %v1631, %v1630
  %v1990 = vpack.c.b16 %v1633, %v1632
  %v1991 = vpack.c.b16 %v1635, %v1634
  %v1992 = vpack.c.b16 %v1637, %v1636
  %v1993 = vpack.c.b16 %v1639, %v1638
  %v1994 = vpack.c.b16 %v1641, %v1640
  %v1995 = vpack.c.b16 %v1643, %v1642
  %v1996 = vpack.c.b16 %v1645, %v1644
  %v1997 = vpack.c.b16 %v1647, %v1646
  %v1998 = vpack.c.b16 %v1649, %v1648
  %v1999 = vpack.c.b16 %v1651, %v1650
  %v2000 = vpack.c.b16 %v1653, %v1652
  %v2001 = vpack.c.b16 %v1655, %v1654
  %v2002 = vpack.c.b16 %v1657, %v1656
  %v2003 = vpack.c.b16 %v1659, %v1658
  %v2004 = vpack.c.b16 %v1661, %v1660
  %v2005 = vpack.c.b16 %v1663, %v1662
  %v2006 = vpack.c.b16 %v1665, %v1664
  %v2007 = vpack.c.b16 %v1667, %v1666
  %v2008 = vpack.c.b16 %v1669, %v1668
  %v2009 = vpack.c.b16 %v1671, %v1670
  %v2010 = vpack.c.b16 %v1673, %v1672
  %v2011 = vpack.c.b16 %v1675, %v1674
  %v2012 = vpack.c.b16 %v1677, %v1676
  %v2013 = vpack.c.b16 %v1679, %v1678
  %v2014 = vpack.c.b16 %v1681, %v1680
  %v2015 = vpack.c.b16 %v1683, %v1682
  %v2016 = vpack.c.b16 %v1685, %v1684
  %v2017 = vpack.c.b16 %v1687, %v1686
  %v2018 = vpack.c.b16 %v1689, %v1688
  %v2019 = vpack.c.b16 %v1691, %v1690
  %v2020 = vpack.c.b16 %v1693, %v1692
  %v2021 = vpack.c.b16 %v1695, %v1694
  %v2022 = vpack.c.b16 %v1697, %v1696
  %v2023 = vpack.c.b16 %v1699, %v1698
  %v2024 = vpack.c.b16 %v1701, %v1700
  %v2025 = vpack.c.b16 %v1703, %v1702
  %v2026 = vpack.c.b16 %v1705, %v1704
  %v2027 = vpack.c.b16 %v1707, %v1706
  %v2028 = vpack.c.b16 %v1709, %v1708
  %v2029 = vpack.c.b16 %v1711, %v1710
  %v2030 = vpack.c.b16 %v1713, %v1712
  %v2031 = vpack.c.b16 %v1715, %v1714
  %v2032 = vpack.c.b16 %v1717, %v1716
  %v2033 = vpack.c.b16 %v1719, %v1718
  %v2034 = vpack.c.b16 %v1721, %v1720
  %v2035 = vpack.c.b16 %v1723, %v1722
  %v2036 = vpack.c.b16 %v1725, %v1724
  %v2037 = vpack.c.b16 %v1727, %v1726
  %v2038 = vpack.c.b16 %v1729, %v1728
  %v2039 = vpack.c.b16 %v1731, %v1730
  %v2040 = vpack.c.b16 %v1733, %v1732
  %v2041 = vpack.c.b16 %v1735, %v1734
  %v2042 = vpack.c.b16 %v1737, %v1736
  %v2043 = vpack.c.b16 %v1739, %v1738
  %v2044 = vpack.c.b16 %v1741, %v1740
  %v2045 = vpack.c.b16 %v1743, %v1742
  %v2046 = vpack.c.b16 %v1745, %v1744
  %v2047 = vpack.c.b16 %v1747, %v1746
  %v2048 = vpack.c.b16 %v1749, %v1748
  %v2049 = vpack.c.b16 %v1751, %v1750
  %v2050 = vpack.c.b16 %v1753, %v1752
  %v2051 = vpack.c.b16 %v1755, %v1754
  %v2052 = vpack.c.b16 %v1757, %v1756
  %v2053 = vpack.c.b16 %v1759, %v1758
  %v2054 = vpack.c.b16 %v1761, %v1760
  %v2055 = vpack.c.b16 %v1763, %v1762
  %v2056 = vpack.c.b16 %v1765, %v1764
  %v2057 = vpack.c.b16 %v1767, %v1766
  %v2058 = vpack.c.b16 %v1769, %v1768
  %v2059 = vpack.c.b16 %v1771, %v1770
  %v2064 = vunpack.c.l.b16 %v609
  %v2065 = vunpack.c.l.b16 %v610
  %v2066 = vunpack.c.l.b16 %v611
  %v2067 = vunpack.c.l.b16 %v612
  %v2068 = vpack.c.b16 %v2065, %v2064
  %v2069 = vpack.c.b16 %v2067, %v2066
  %vm2071 = vcmask 203776
  %v2073 = vsel %vm2071, %v1772, 0
  %v2076 = vsel %vm2071, %v1773, 0
  %v2079 = vsel %vm2071, %v1774, 0
  %v2082 = vsel %vm2071, %v1775, 0
  %v2085 = vsel %vm2071, %v1776, 0
  %v2088 = vsel %vm2071, %v1777, 0
  %v2091 = vsel %vm2071, %v1778, 0
  %v2094 = vsel %vm2071, %v1779, 0
  %v2097 = vsel %vm2071, %v1780, 0
  %v2100 = vsel %vm2071, %v1781, 0
  %v2103 = vsel %vm2071, %v1782, 0
  %v2106 = vsel %vm2071, %v1783, 0
  %v2109 = vsel %vm2071, %v1784, 0
  %v2112 = vsel %vm2071, %v1785, 0
  %v2115 = vsel %vm2071, %v1786, 0
  %v2118 = vsel %vm2071, %v1787, 0
  %v2121 = vsel %vm2071, %v1788, 0
  %v2124 = vsel %vm2071, %v1789, 0
  %v2127 = vsel %vm2071, %v1790, 0
  %v2130 = vsel %vm2071, %v1791, 0
  %v2133 = vsel %vm2071, %v1792, 0
  %v2136 = vsel %vm2071, %v1793, 0
  %v2139 = vsel %vm2071, %v1794, 0
  %v2142 = vsel %vm2071, %v1795, 0
  %v2145 = vsel %vm2071, %v1796, 0
  %v2148 = vsel %vm2071, %v1797, 0
  %v2151 = vsel %vm2071, %v1798, 0
  %v2154 = vsel %vm2071, %v1799, 0
  %v2157 = vsel %vm2071, %v1800, 0
  %v2160 = vsel %vm2071, %v1801, 0
  %v2163 = vsel %vm2071, %v1802, 0
  %v2166 = vsel %vm2071, %v1803, 0
  %v2169 = vsel %vm2071, %v1804, 0
  %v2172 = vsel %vm2071, %v1805, 0
  %v2175 = vsel %vm2071, %v1806, 0
  %v2178 = vsel %vm2071, %v1807, 0
  %v2181 = vsel %vm2071, %v1808, 0
  %v2184 = vsel %vm2071, %v1809, 0
  %v2187 = vsel %vm2071, %v1810, 0
  %v2190 = vsel %vm2071, %v1811, 0
  %v2193 = vsel %vm2071, %v1812, 0
  %v2196 = vsel %vm2071, %v1813, 0
  %v2199 = vsel %vm2071, %v1814, 0
  %v2202 = vsel %vm2071, %v1815, 0
  %v2205 = vsel %vm2071, %v1816, 0
  %v2208 = vsel %vm2071, %v1817, 0
  %v2211 = vsel %vm2071, %v1818, 0
  %v2214 = vsel %vm2071, %v1819, 0
  %v2217 = vsel %vm2071, %v1820, 0
  %v2220 = vsel %vm2071, %v1821, 0
  %v2223 = vsel %vm2071, %v1822, 0
  %v2226 = vsel %vm2071, %v1823, 0
  %v2229 = vsel %vm2071, %v1824, 0
  %v2232 = vsel %vm2071, %v1825, 0
  %v2235 = vsel %vm2071, %v1826, 0
  %v2238 = vsel %vm2071, %v1827, 0
  %v2241 = vsel %vm2071, %v1828, 0
  %v2244 = vsel %vm2071, %v1829, 0
  %v2247 = vsel %vm2071, %v1830, 0
  %v2250 = vsel %vm2071, %v1831, 0
  %v2253 = vsel %vm2071, %v1832, 0
  %v2256 = vsel %vm2071, %v1833, 0
  %v2259 = vsel %vm2071, %v1834, 0
  %v2262 = vsel %vm2071, %v1835, 0
  %v2265 = vsel %vm2071, %v1836, 0
  %v2268 = vsel %vm2071, %v1837, 0
  %v2271 = vsel %vm2071, %v1838, 0
  %v2274 = vsel %vm2071, %v1839, 0
  %v2277 = vsel %vm2071, %v1840, 0
  %v2280 = vsel %vm2071, %v1841, 0
  %v2283 = vsel %vm2071, %v1842, 0
  %v2286 = vsel %vm2071, %v1843, 0
  %v2289 = vsel %vm2071, %v1844, 0
  %v2292 = vsel %vm2071, %v1845, 0
  %v2295 = vsel %vm2071, %v1846, 0
  %v2298 = vsel %vm2071, %v1847, 0
  %v2301 = vsel %vm2071, %v1848, 0
  %v2304 = vsel %vm2071, %v1849, 0
  %v2307 = vsel %vm2071, %v1850, 0
  %v2310 = vsel %vm2071, %v1851, 0
  %v2313 = vsel %vm2071, %v1852, 0
  %v2316 = vsel %vm2071, %v1853, 0
  %v2319 = vsel %vm2071, %v1854, 0
  %v2322 = vsel %vm2071, %v1855, 0
  %v2325 = vsel %vm2071, %v1856, 0
  %v2328 = vsel %vm2071, %v1857, 0
  %v2331 = vsel %vm2071, %v1858, 0
  %v2334 = vsel %vm2071, %v1859, 0
  %v2337 = vsel %vm2071, %v1860, 0
  %v2340 = vsel %vm2071, %v1861, 0
  %v2343 = vsel %vm2071, %v1862, 0
  %v2346 = vsel %vm2071, %v1863, 0
  %v2349 = vsel %vm2071, %v1864, 0
  %v2352 = vsel %vm2071, %v1865, 0
  %v2355 = vsel %vm2071, %v1866, 0
  %v2358 = vsel %vm2071, %v1867, 0
  %v2361 = vsel %vm2071, %v1868, 0
  %v2364 = vsel %vm2071, %v1869, 0
  %v2367 = vsel %vm2071, %v1870, 0
  %v2370 = vsel %vm2071, %v1871, 0
  %v2373 = vsel %vm2071, %v1872, 0
  %v2376 = vsel %vm2071, %v1873, 0
  %v2379 = vsel %vm2071, %v1874, 0
  %v2382 = vsel %vm2071, %v1875, 0
  %v2385 = vsel %vm2071, %v1876, 0
  %v2388 = vsel %vm2071, %v1877, 0
  %v2391 = vsel %vm2071, %v1878, 0
  %v2394 = vsel %vm2071, %v1879, 0
  %v2397 = vsel %vm2071, %v1880, 0
  %v2400 = vsel %vm2071, %v1881, 0
  %v2403 = vsel %vm2071, %v1882, 0
  %v2406 = vsel %vm2071, %v1883, 0
  %v2409 = vsel %vm2071, %v1884, 0
  %v2412 = vsel %vm2071, %v1885, 0
  %v2415 = vsel %vm2071, %v1886, 0
  %v2418 = vsel %vm2071, %v1887, 0
  %v2421 = vsel %vm2071, %v1888, 0
  %v2424 = vsel %vm2071, %v1889, 0
  %v2427 = vsel %vm2071, %v1890, 0
  %v2430 = vsel %vm2071, %v1891, 0
  %v2433 = vsel %vm2071, %v1892, 0
  %v2436 = vsel %vm2071, %v1893, 0
  %v2439 = vsel %vm2071, %v1894, 0
  %v2442 = vsel %vm2071, %v1895, 0
  %v2445 = vsel %vm2071, %v1896, 0
  %v2448 = vsel %vm2071, %v1897, 0
  %v2451 = vsel %vm2071, %v1898, 0
  %v2454 = vsel %vm2071, %v1899, 0
  %v2457 = vsel %vm2071, %v1900, 0
  %v2460 = vsel %vm2071, %v1901, 0
  %v2463 = vsel %vm2071, %v1902, 0
  %v2466 = vsel %vm2071, %v1903, 0
  %v2469 = vsel %vm2071, %v1904, 0
  %v2472 = vsel %vm2071, %v1905, 0
  %v2475 = vsel %vm2071, %v1906, 0
  %v2478 = vsel %vm2071, %v1907, 0
  %v2481 = vsel %vm2071, %v1908, 0
  %v2484 = vsel %vm2071, %v1909, 0
  %v2487 = vsel %vm2071, %v1910, 0
  %v2490 = vsel %vm2071, %v1911, 0
  %v2493 = vsel %vm2071, %v1912, 0
  %v2496 = vsel %vm2071, %v1913, 0
  %v2499 = vsel %vm2071, %v1914, 0
  %v2502 = vsel %vm2071, %v1915, 0
  %v2505 = vsel %vm2071, %v1916, 0
  %v2508 = vsel %vm2071, %v1917, 0
  %v2511 = vsel %vm2071, %v1918, 0
  %v2514 = vsel %vm2071, %v1919, 0
  %v2517 = vsel %vm2071, %v1920, 0
  %v2520 = vsel %vm2071, %v1921, 0
  %v2523 = vsel %vm2071, %v1922, 0
  %v2526 = vsel %vm2071, %v1923, 0
  %v2529 = vsel %vm2071, %v1924, 0
  %v2532 = vsel %vm2071, %v1925, 0
  %v2535 = vsel %vm2071, %v1926, 0
  %v2538 = vsel %vm2071, %v1927, 0
  %v2541 = vsel %vm2071, %v1928, 0
  %v2544 = vsel %vm2071, %v1929, 0
  %v2547 = vsel %vm2071, %v1930, 0
  %v2550 = vsel %vm2071, %v1931, 0
  %v2553 = vsel %vm2071, %v1932, 0
  %v2556 = vsel %vm2071, %v1933, 0
  %v2559 = vsel %vm2071, %v1934, 0
  %v2562 = vsel %vm2071, %v1935, 0
  %v2565 = vsel %vm2071, %v1936, 0
  %v2568 = vsel %vm2071, %v1937, 0
  %v2571 = vsel %vm2071, %v1938, 0
  %v2574 = vsel %vm2071, %v1939, 0
  %v2577 = vsel %vm2071, %v1940, 0
  %v2580 = vsel %vm2071, %v1941, 0
  %v2583 = vsel %vm2071, %v1942, 0
  %v2586 = vsel %vm2071, %v1943, 0
  %v2589 = vsel %vm2071, %v1944, 0
  %v2592 = vsel %vm2071, %v1945, 0
  %v2595 = vsel %vm2071, %v1946, 0
  %v2598 = vsel %vm2071, %v1947, 0
  %v2601 = vsel %vm2071, %v1948, 0
  %v2604 = vsel %vm2071, %v1949, 0
  %v2607 = vsel %vm2071, %v1950, 0
  %v2610 = vsel %vm2071, %v1951, 0
  %v2613 = vsel %vm2071, %v1952, 0
  %v2616 = vsel %vm2071, %v1953, 0
  %v2619 = vsel %vm2071, %v1954, 0
  %v2622 = vsel %vm2071, %v1955, 0
  %v2625 = vsel %vm2071, %v1956, 0
  %v2628 = vsel %vm2071, %v1957, 0
  %v2631 = vsel %vm2071, %v1958, 0
  %v2634 = vsel %vm2071, %v1959, 0
  %v2637 = vsel %vm2071, %v1960, 0
  %v2640 = vsel %vm2071, %v1961, 0
  %v2643 = vsel %vm2071, %v1962, 0
  %v2646 = vsel %vm2071, %v1963, 0
  %v2649 = vsel %vm2071, %v1964, 0
  %v2652 = vsel %vm2071, %v1965, 0
  %v2655 = vsel %vm2071, %v1966, 0
  %v2658 = vsel %vm2071, %v1967, 0
  %v2661 = vsel %vm2071, %v1968, 0
  %v2664 = vsel %vm2071, %v1969, 0
  %v2667 = vsel %vm2071, %v1970, 0
  %v2670 = vsel %vm2071, %v1971, 0
  %v2673 = vsel %vm2071, %v1972, 0
  %v2676 = vsel %vm2071, %v1973, 0
  %v2679 = vsel %vm2071, %v1974, 0
  %v2682 = vsel %vm2071, %v1975, 0
  %v2685 = vsel %vm2071, %v1976, 0
  %v2688 = vsel %vm2071, %v1977, 0
  %v2691 = vsel %vm2071, %v1978, 0
  %v2694 = vsel %vm2071, %v1979, 0
  %v2697 = vsel %vm2071, %v1980, 0
  %v2700 = vsel %vm2071, %v1981, 0
  %v2703 = vsel %vm2071, %v1982, 0
  %v2706 = vsel %vm2071, %v1983, 0
  %v2709 = vsel %vm2071, %v1984, 0
  %v2712 = vsel %vm2071, %v1985, 0
  %v2715 = vsel %vm2071, %v1986, 0
  %v2718 = vsel %vm2071, %v1987, 0
  %v2721 = vsel %vm2071, %v1988, 0
  %v2724 = vsel %vm2071, %v1989, 0
  %v2727 = vsel %vm2071, %v1990, 0
  %v2730 = vsel %vm2071, %v1991, 0
  %v2733 = vsel %vm2071, %v1992, 0
  %v2736 = vsel %vm2071, %v1993, 0
  %v2739 = vsel %vm2071, %v1994, 0
  %v2742 = vsel %vm2071, %v1995, 0
  %v2745 = vsel %vm2071, %v1996, 0
  %v2748 = vsel %vm2071, %v1997, 0
  %v2751 = vsel %vm2071, %v1998, 0
  %v2754 = vsel %vm2071, %v1999, 0
  %v2757 = vsel %vm2071, %v2000, 0
  %v2760 = vsel %vm2071, %v2001, 0
  %v2763 = vsel %vm2071, %v2002, 0
  %v2766 = vsel %vm2071, %v2003, 0
  %v2769 = vsel %vm2071, %v2004, 0
  %v2772 = vsel %vm2071, %v2005, 0
  %v2775 = vsel %vm2071, %v2006, 0
  %v2778 = vsel %vm2071, %v2007, 0
  %v2781 = vsel %vm2071, %v2008, 0
  %v2784 = vsel %vm2071, %v2009, 0
  %v2787 = vsel %vm2071, %v2010, 0
  %v2790 = vsel %vm2071, %v2011, 0
  %v2793 = vsel %vm2071, %v2012, 0
  %v2796 = vsel %vm2071, %v2013, 0
  %v2799 = vsel %vm2071, %v2014, 0
  %v2802 = vsel %vm2071, %v2015, 0
  %v2805 = vsel %vm2071, %v2016, 0
  %v2808 = vsel %vm2071, %v2017, 0
  %v2811 = vsel %vm2071, %v2018, 0
  %v2814 = vsel %vm2071, %v2019, 0
  %v2817 = vsel %vm2071, %v2020, 0
  %v2820 = vsel %vm2071, %v2021, 0
  %v2823 = vsel %vm2071, %v2022, 0
  %v2826 = vsel %vm2071, %v2023, 0
  %v2829 = vsel %vm2071, %v2024, 0
  %v2832 = vsel %vm2071, %v2025, 0
  %v2835 = vsel %vm2071, %v2026, 0
  %v2838 = vsel %vm2071, %v2027, 0
  %v2841 = vsel %vm2071, %v2028, 0
  %v2844 = vsel %vm2071, %v2029, 0
  %v2847 = vsel %vm2071, %v2030, 0
  %v2850 = vsel %vm2071, %v2031, 0
  %v2853 = vsel %vm2071, %v2032, 0
  %v2856 = vsel %vm2071, %v2033, 0
  %v2859 = vsel %vm2071, %v2034, 0
  %v2862 = vsel %vm2071, %v2035, 0
  %v2865 = vsel %vm2071, %v2036, 0
  %v2868 = vsel %vm2071, %v2037, 0
  %v2871 = vsel %vm2071, %v2038, 0
  %v2874 = vsel %vm2071, %v2039, 0
  %v2877 = vsel %vm2071, %v2040, 0
  %v2880 = vsel %vm2071, %v2041, 0
  %v2883 = vsel %vm2071, %v2042, 0
  %v2886 = vsel %vm2071, %v2043, 0
  %v2889 = vsel %vm2071, %v2044, 0
  %v2892 = vsel %vm2071, %v2045, 0
  %v2895 = vsel %vm2071, %v2046, 0
  %v2898 = vsel %vm2071, %v2047, 0
  %v2901 = vsel %vm2071, %v2048, 0
  %v2904 = vsel %vm2071, %v2049, 0
  %v2907 = vsel %vm2071, %v2050, 0
  %v2910 = vsel %vm2071, %v2051, 0
  %v2913 = vsel %vm2071, %v2052, 0
  %v2916 = vsel %vm2071, %v2053, 0
  %v2919 = vsel %vm2071, %v2054, 0
  %v2922 = vsel %vm2071, %v2055, 0
  %v2925 = vsel %vm2071, %v2056, 0
  %v2928 = vsel %vm2071, %v2057, 0
  %v2931 = vsel %vm2071, %v2058, 0
  %v2934 = vsel %vm2071, %v2059, 0
  %vm2936 = vcmask 1043456
  %vm2937 = vcmask 1044480
  %v2938 = vsel %vm2936, 4294967295, 65535
  %v2939 = vsel %vm2937, %v2938, 0
  %v2941 = vand.u32 %v2069, %v2939
  %2943 = vmatprep.subr.bf16.mxu0 0
  %2944 = vmatpush1.bf16.msra.mxu0 %v2068
  %2945 = vmatprep.subr.bf16.mxu0 0
  %2946 = vmatpush1.bf16.msra.mxu0 %v2941
  %2947 = vmatprep.subr.bf16.mxu0 0
  %2948 = vmatpush1.bf16.msra.mxu0 0
  %2949 = vmatprep.subr.bf16.mxu0 0
  %2950 = vmatpush1.bf16.msra.mxu0 0
  %2951 = vmatprep.subr.bf16.mxu0 0
  %2952 = vmatpush1.bf16.msra.mxu0 0
  %2953 = vmatprep.subr.bf16.mxu0 0
  %2954 = vmatpush1.bf16.msra.mxu0 0
  %2955 = vmatprep.subr.bf16.mxu0 0
  %2956 = vmatpush1.bf16.msra.mxu0 0
  %2957 = vmatprep.subr.bf16.mxu0 0
  %2958 = vmatpush1.bf16.msra.mxu0 0
  %2959 = vmatprep.subr.bf16.mxu0 0
  %2960 = vmatpush1.bf16.msra.mxu0 0
  %2961 = vmatprep.subr.bf16.mxu0 0
  %2962 = vmatpush1.bf16.msra.mxu0 0
  %2963 = vmatprep.subr.bf16.mxu0 0
  %2964 = vmatpush1.bf16.msra.mxu0 0
  %2965 = vmatprep.subr.bf16.mxu0 0
  %2966 = vmatpush1.bf16.msra.mxu0 0
  %2967 = vmatprep.subr.bf16.mxu0 0
  %2968 = vmatpush1.bf16.msra.mxu0 0
  %2969 = vmatprep.subr.bf16.mxu0 0
  %2970 = vmatpush1.bf16.msra.mxu0 0
  %2971 = vmatprep.subr.bf16.mxu0 0
  %2972 = vmatpush1.bf16.msra.mxu0 0
  %2973 = vmatprep.subr.bf16.mxu0 0
  %2974 = vmatpush1.bf16.msra.mxu0 0
  %2975 = vmatprep.mubr.bf16.mxu0 0
  %2976 = vmatmul.mubr.bf16.gmra.mrb[0].mxu0 %v2073
  %v2977 = vpop.f32.mrb[0].mxu0
  %v2978 = vadd.f32 %v618, %v2977
  %v2979 = vpop.f32.mrb[0].mxu0
  %v2980 = vpop.f32.mrb[0].mxu0
  %v2981 = vadd.f32 %v618, %v2980
  %v2982 = vpop.f32.mrb[0].mxu0
  %2983 = vmatprep.mubr.bf16.mxu0 0
  %2984 = vmatmul.mubr.bf16.gmra.mrb[0].mxu0 %v2076
  %v2985 = vpop.f32.mrb[0].mxu0
  %v2986 = vadd.f32 %v618, %v2985
  %v2987 = vpop.f32.mrb[0].mxu0
  %v2988 = vpop.f32.mrb[0].mxu0
  %v2989 = vadd.f32 %v618, %v2988
  %v2990 = vpop.f32.mrb[0].mxu0
  %2991 = vmatprep.mubr.bf16.mxu0 0
  %2992 = vmatmul.mubr.bf16.gmra.mrb[0].mxu0 %v2079
  %v2993 = vpop.f32.mrb[0].mxu0
  %v2994 = vadd.f32 %v618, %v2993
  %v2995 = vpop.f32.mrb[0].mxu0
  %v2996 = vpop.f32.mrb[0].mxu0
  %v2997 = vadd.f32 %v618, %v2996
  %v2998 = vpop.f32.mrb[0].mxu0
  %2999 = vmatprep.mubr.bf16.mxu0 0
  %3000 = vmatmul.mubr.bf16.gmra.mrb[0].mxu0 %v2082
  %v3001 = vpop.f32.mrb[0].mxu0
  %v3002 = vadd.f32 %v618, %v3001
  %v3003 = vpop.f32.mrb[0].mxu0
  %v3004 = vpop.f32.mrb[0].mxu0
  %v3005 = vadd.f32 %v618, %v3004
  %v3006 = vpop.f32.mrb[0].mxu0
  %3007 = vmatprep.mubr.bf16.mxu0 0
  %3008 = vmatmul.mubr.bf16.gmra.mrb[0].mxu0 %v2085
  %v3009 = vpop.f32.mrb[0].mxu0
  %v3010 = vadd.f32 %v618, %v3009
  %v3011 = vpop.f32.mrb[0].mxu0
  %v3012 = vpop.f32.mrb[0].mxu0
  %v3013 = vadd.f32 %v618, %v3012
  %v3014 = vpop.f32.mrb[0].mxu0
  %3015 = vmatprep.mubr.bf16.mxu0 0
  %3016 = vmatmul.mubr.bf16.gmra.mrb[0].mxu0 %v2088
  %v3017 = vpop.f32.mrb[0].mxu0
  %v3018 = vadd.f32 %v618, %v3017
  %v3019 = vpop.f32.mrb[0].mxu0
  %v3020 = vpop.f32.mrb[0].mxu0
  %v3021 = vadd.f32 %v618, %v3020
  %v3022 = vpop.f32.mrb[0].mxu0
  %3023 = vmatprep.mubr.bf16.mxu0 0
  %3024 = vmatmul.mubr.bf16.gmra.mrb[0].mxu0 %v2091
  %v3025 = vpop.f32.mrb[0].mxu0
  %v3026 = vadd.f32 %v618, %v3025
  %v3027 = vpop.f32.mrb[0].mxu0
  %v3028 = vpop.f32.mrb[0].mxu0
  %v3029 = vadd.f32 %v618, %v3028
  %v3030 = vpop.f32.mrb[0].mxu0
  %3031 = vmatprep.mubr.bf16.mxu0 0
  %3032 = vmatmul.mubr.bf16.gmra.mrb[0].mxu0 %v2094
  %v3033 = vpop.f32.mrb[0].mxu0
  %v3034 = vadd.f32 %v618, %v3033
  %v3035 = vpop.f32.mrb[0].mxu0
  %v3036 = vpop.f32.mrb[0].mxu0
  %v3037 = vadd.f32 %v618, %v3036
  %v3038 = vpop.f32.mrb[0].mxu0
  %3039 = vmatprep.mubr.bf16.mxu0 0
  %3040 = vmatmul.mubr.bf16.gmra.mrb[0].mxu0 %v2097
  %v3041 = vpop.f32.mrb[0].mxu0
  %v3042 = vadd.f32 %v618, %v3041
  %v3043 = vpop.f32.mrb[0].mxu0
  %v3044 = vpop.f32.mrb[0].mxu0
  %v3045 = vadd.f32 %v618, %v3044
  %v3046 = vpop.f32.mrb[0].mxu0
  %3047 = vmatprep.mubr.bf16.mxu0 0
  %3048 = vmatmul.mubr.bf16.gmra.mrb[0].mxu0 %v2100
  %v3049 = vpop.f32.mrb[0].mxu0
  %v3050 = vadd.f32 %v618, %v3049
  %v3051 = vpop.f32.mrb[0].mxu0
  %v3052 = vpop.f32.mrb[0].mxu0
  %v3053 = vadd.f32 %v618, %v3052
  %v3054 = vpop.f32.mrb[0].mxu0
  %3055 = vmatprep.mubr.bf16.mxu0 0
  %3056 = vmatmul.mubr.bf16.gmra.mrb[0].mxu0 %v2103
  %v3057 = vpop.f32.mrb[0].mxu0
  %v3058 = vadd.f32 %v618, %v3057
  %v3059 = vpop.f32.mrb[0].mxu0
  %v3060 = vpop.f32.mrb[0].mxu0
  %v3061 = vadd.f32 %v618, %v3060
  %v3062 = vpop.f32.mrb[0].mxu0
  %3063 = vmatprep.mubr.bf16.mxu0 0
  %3064 = vmatmul.mubr.bf16.gmra.mrb[0].mxu0 %v2106
  %v3065 = vpop.f32.mrb[0].mxu0
  %v3066 = vadd.f32 %v618, %v3065
  %v3067 = vpop.f32.mrb[0].mxu0
  %v3068 = vpop.f32.mrb[0].mxu0
  %v3069 = vadd.f32 %v618, %v3068
  %v3070 = vpop.f32.mrb[0].mxu0
  %3071 = vmatprep.mubr.bf16.mxu0 0
  %3072 = vmatmul.mubr.bf16.gmra.mrb[0].mxu0 %v2109
  %v3073 = vpop.f32.mrb[0].mxu0
  %v3074 = vadd.f32 %v618, %v3073
  %v3075 = vpop.f32.mrb[0].mxu0
  %v3076 = vpop.f32.mrb[0].mxu0
  %v3077 = vadd.f32 %v618, %v3076
  %v3078 = vpop.f32.mrb[0].mxu0
  %3079 = vmatprep.mubr.bf16.mxu0 0
  %3080 = vmatmul.mubr.bf16.gmra.mrb[0].mxu0 %v2112
  %v3081 = vpop.f32.mrb[0].mxu0
  %v3082 = vadd.f32 %v618, %v3081
  %v3083 = vpop.f32.mrb[0].mxu0
  %v3084 = vpop.f32.mrb[0].mxu0
  %v3085 = vadd.f32 %v618, %v3084
  %v3086 = vpop.f32.mrb[0].mxu0
  %3087 = vmatprep.mubr.bf16.mxu0 0
  %3088 = vmatmul.mubr.bf16.gmra.mrb[0].mxu0 %v2115
  %v3089 = vpop.f32.mrb[0].mxu0
  %v3090 = vadd.f32 %v618, %v3089
  %v3091 = vpop.f32.mrb[0].mxu0
  %v3092 = vpop.f32.mrb[0].mxu0
  %v3093 = vadd.f32 %v618, %v3092
  %v3094 = vpop.f32.mrb[0].mxu0
  %3095 = vmatprep.mubr.bf16.mxu0 0
  %3096 = vmatmul.mubr.bf16.gmra.mrb[0].mxu0 %v2118
  %v3097 = vpop.f32.mrb[0].mxu0
  %v3098 = vadd.f32 %v618, %v3097
  %v3099 = vpop.f32.mrb[0].mxu0
  %v3100 = vpop.f32.mrb[0].mxu0
  %v3101 = vadd.f32 %v618, %v3100
  %v3102 = vpop.f32.mrb[0].mxu0
  %3103 = vmatprep.mubr.bf16.mxu0 0
  %3104 = vmatmul.mubr.bf16.gmra.mrb[0].mxu0 %v2121
  %v3105 = vpop.f32.mrb[0].mxu0
  %v3106 = vadd.f32 %v618, %v3105
  %v3107 = vpop.f32.mrb[0].mxu0
  %v3108 = vpop.f32.mrb[0].mxu0
  %v3109 = vadd.f32 %v618, %v3108
  %v3110 = vpop.f32.mrb[0].mxu0
  %3111 = vmatprep.mubr.bf16.mxu0 0
  %3112 = vmatmul.mubr.bf16.gmra.mrb[0].mxu0 %v2124
  %v3113 = vpop.f32.mrb[0].mxu0
  %v3114 = vadd.f32 %v618, %v3113
  %v3115 = vpop.f32.mrb[0].mxu0
  %v3116 = vpop.f32.mrb[0].mxu0
  %v3117 = vadd.f32 %v618, %v3116
  %v3118 = vpop.f32.mrb[0].mxu0
  %3119 = vmatprep.mubr.bf16.mxu0 0
  %3120 = vmatmul.mubr.bf16.gmra.mrb[0].mxu0 %v2127
  %v3121 = vpop.f32.mrb[0].mxu0
  %v3122 = vadd.f32 %v618, %v3121
  %v3123 = vpop.f32.mrb[0].mxu0
  %v3124 = vpop.f32.mrb[0].mxu0
  %v3125 = vadd.f32 %v618, %v3124
  %v3126 = vpop.f32.mrb[0].mxu0
  %3127 = vmatprep.mubr.bf16.mxu0 0
  %3128 = vmatmul.mubr.bf16.gmra.mrb[0].mxu0 %v2130
  %v3129 = vpop.f32.mrb[0].mxu0
  %v3130 = vadd.f32 %v618, %v3129
  %v3131 = vpop.f32.mrb[0].mxu0
  %v3132 = vpop.f32.mrb[0].mxu0
  %v3133 = vadd.f32 %v618, %v3132
  %v3134 = vpop.f32.mrb[0].mxu0
  %3135 = vmatprep.mubr.bf16.mxu0 0
  %3136 = vmatmul.mubr.bf16.gmra.mrb[0].mxu0 %v2133
  %v3137 = vpop.f32.mrb[0].mxu0
  %v3138 = vadd.f32 %v618, %v3137
  %v3139 = vpop.f32.mrb[0].mxu0
  %v3140 = vpop.f32.mrb[0].mxu0
  %v3141 = vadd.f32 %v618, %v3140
  %v3142 = vpop.f32.mrb[0].mxu0
  %3143 = vmatprep.mubr.bf16.mxu0 0
  %3144 = vmatmul.mubr.bf16.gmra.mrb[0].mxu0 %v2136
  %v3145 = vpop.f32.mrb[0].mxu0
  %v3146 = vadd.f32 %v618, %v3145
  %v3147 = vpop.f32.mrb[0].mxu0
  %v3148 = vpop.f32.mrb[0].mxu0
  %v3149 = vadd.f32 %v618, %v3148
  %v3150 = vpop.f32.mrb[0].mxu0
  %3151 = vmatprep.mubr.bf16.mxu0 0
  %3152 = vmatmul.mubr.bf16.gmra.mrb[0].mxu0 %v2139
  %v3153 = vpop.f32.mrb[0].mxu0
  %v3154 = vadd.f32 %v618, %v3153
  %v3155 = vpop.f32.mrb[0].mxu0
  %v3156 = vpop.f32.mrb[0].mxu0
  %v3157 = vadd.f32 %v618, %v3156
  %v3158 = vpop.f32.mrb[0].mxu0
  %3159 = vmatprep.mubr.bf16.mxu0 0
  %3160 = vmatmul.mubr.bf16.gmra.mrb[0].mxu0 %v2142
  %v3161 = vpop.f32.mrb[0].mxu0
  %v3162 = vadd.f32 %v618, %v3161
  %v3163 = vpop.f32.mrb[0].mxu0
  %v3164 = vpop.f32.mrb[0].mxu0
  %v3165 = vadd.f32 %v618, %v3164
  %v3166 = vpop.f32.mrb[0].mxu0
  %3167 = vmatprep.mubr.bf16.mxu0 0
  %3168 = vmatmul.mubr.bf16.gmra.mrb[0].mxu0 %v2145
  %v3169 = vpop.f32.mrb[0].mxu0
  %v3170 = vadd.f32 %v618, %v3169
  %v3171 = vpop.f32.mrb[0].mxu0
  %v3172 = vpop.f32.mrb[0].mxu0
  %v3173 = vadd.f32 %v618, %v3172
  %v3174 = vpop.f32.mrb[0].mxu0
  %3175 = vmatprep.mubr.bf16.mxu0 0
  %3176 = vmatmul.mubr.bf16.gmra.mrb[0].mxu0 %v2148
  %v3177 = vpop.f32.mrb[0].mxu0
  %v3178 = vadd.f32 %v618, %v3177
  %v3179 = vpop.f32.mrb[0].mxu0
  %v3180 = vpop.f32.mrb[0].mxu0
  %v3181 = vadd.f32 %v618, %v3180
  %v3182 = vpop.f32.mrb[0].mxu0
  %3183 = vmatprep.mubr.bf16.mxu0 0
  %3184 = vmatmul.mubr.bf16.gmra.mrb[0].mxu0 %v2151
  %v3185 = vpop.f32.mrb[0].mxu0
  %v3186 = vadd.f32 %v618, %v3185
  %v3187 = vpop.f32.mrb[0].mxu0
  %v3188 = vpop.f32.mrb[0].mxu0
  %v3189 = vadd.f32 %v618, %v3188
  %v3190 = vpop.f32.mrb[0].mxu0
  %3191 = vmatprep.mubr.bf16.mxu0 0
  %3192 = vmatmul.mubr.bf16.gmra.mrb[0].mxu0 %v2154
  %v3193 = vpop.f32.mrb[0].mxu0
  %v3194 = vadd.f32 %v618, %v3193
  %v3195 = vpop.f32.mrb[0].mxu0
  %v3196 = vpop.f32.mrb[0].mxu0
  %v3197 = vadd.f32 %v618, %v3196
  %v3198 = vpop.f32.mrb[0].mxu0
  %3199 = vmatprep.mubr.bf16.mxu0 0
  %3200 = vmatmul.mubr.bf16.gmra.mrb[0].mxu0 %v2157
  %v3201 = vpop.f32.mrb[0].mxu0
  %v3202 = vadd.f32 %v618, %v3201
  %v3203 = vpop.f32.mrb[0].mxu0
  %v3204 = vpop.f32.mrb[0].mxu0
  %v3205 = vadd.f32 %v618, %v3204
  %v3206 = vpop.f32.mrb[0].mxu0
  %3207 = vmatprep.mubr.bf16.mxu0 0
  %3208 = vmatmul.mubr.bf16.gmra.mrb[0].mxu0 %v2160
  %v3209 = vpop.f32.mrb[0].mxu0
  %v3210 = vadd.f32 %v618, %v3209
  %v3211 = vpop.f32.mrb[0].mxu0
  %v3212 = vpop.f32.mrb[0].mxu0
  %v3213 = vadd.f32 %v618, %v3212
  %v3214 = vpop.f32.mrb[0].mxu0
  %3215 = vmatprep.mubr.bf16.mxu0 0
  %3216 = vmatmul.mubr.bf16.gmra.mrb[0].mxu0 %v2163
  %v3217 = vpop.f32.mrb[0].mxu0
  %v3218 = vadd.f32 %v618, %v3217
  %v3219 = vpop.f32.mrb[0].mxu0
  %v3220 = vpop.f32.mrb[0].mxu0
  %v3221 = vadd.f32 %v618, %v3220
  %v3222 = vpop.f32.mrb[0].mxu0
  %3223 = vmatprep.mubr.bf16.mxu0 0
  %3224 = vmatmul.mubr.bf16.gmra.mrb[0].mxu0 %v2166
  %v3225 = vpop.f32.mrb[0].mxu0
  %v3226 = vadd.f32 %v618, %v3225
  %v3227 = vpop.f32.mrb[0].mxu0
  %v3228 = vpop.f32.mrb[0].mxu0
  %v3229 = vadd.f32 %v618, %v3228
  %v3230 = vpop.f32.mrb[0].mxu0
  %3231 = vmatprep.mubr.bf16.mxu0 0
  %3232 = vmatmul.mubr.bf16.gmra.mrb[0].mxu0 %v2169
  %v3233 = vpop.f32.mrb[0].mxu0
  %v3234 = vadd.f32 %v618, %v3233
  %v3235 = vpop.f32.mrb[0].mxu0
  %v3236 = vpop.f32.mrb[0].mxu0
  %v3237 = vadd.f32 %v618, %v3236
  %v3238 = vpop.f32.mrb[0].mxu0
  %3239 = vmatprep.mubr.bf16.mxu0 0
  %3240 = vmatmul.mubr.bf16.gmra.mrb[0].mxu0 %v2172
  %v3241 = vpop.f32.mrb[0].mxu0
  %v3242 = vadd.f32 %v618, %v3241
  %v3243 = vpop.f32.mrb[0].mxu0
  %v3244 = vpop.f32.mrb[0].mxu0
  %v3245 = vadd.f32 %v618, %v3244
  %v3246 = vpop.f32.mrb[0].mxu0
  %3247 = vmatprep.mubr.bf16.mxu0 0
  %3248 = vmatmul.mubr.bf16.gmra.mrb[0].mxu0 %v2175
  %v3249 = vpop.f32.mrb[0].mxu0
  %v3250 = vadd.f32 %v618, %v3249
  %v3251 = vpop.f32.mrb[0].mxu0
  %v3252 = vpop.f32.mrb[0].mxu0
  %v3253 = vadd.f32 %v618, %v3252
  %v3254 = vpop.f32.mrb[0].mxu0
  %3255 = vmatprep.mubr.bf16.mxu0 0
  %3256 = vmatmul.mubr.bf16.gmra.mrb[0].mxu0 %v2178
  %v3257 = vpop.f32.mrb[0].mxu0
  %v3258 = vadd.f32 %v618, %v3257
  %v3259 = vpop.f32.mrb[0].mxu0
  %v3260 = vpop.f32.mrb[0].mxu0
  %v3261 = vadd.f32 %v618, %v3260
  %v3262 = vpop.f32.mrb[0].mxu0
  %3263 = vmatprep.mubr.bf16.mxu0 0
  %3264 = vmatmul.mubr.bf16.gmra.mrb[0].mxu0 %v2181
  %v3265 = vpop.f32.mrb[0].mxu0
  %v3266 = vadd.f32 %v618, %v3265
  %v3267 = vpop.f32.mrb[0].mxu0
  %v3268 = vpop.f32.mrb[0].mxu0
  %v3269 = vadd.f32 %v618, %v3268
  %v3270 = vpop.f32.mrb[0].mxu0
  %3271 = vmatprep.mubr.bf16.mxu0 0
  %3272 = vmatmul.mubr.bf16.gmra.mrb[0].mxu0 %v2184
  %v3273 = vpop.f32.mrb[0].mxu0
  %v3274 = vadd.f32 %v618, %v3273
  %v3275 = vpop.f32.mrb[0].mxu0
  %v3276 = vpop.f32.mrb[0].mxu0
  %v3277 = vadd.f32 %v618, %v3276
  %v3278 = vpop.f32.mrb[0].mxu0
  %3279 = vmatprep.mubr.bf16.mxu0 0
  %3280 = vmatmul.mubr.bf16.gmra.mrb[0].mxu0 %v2187
  %v3281 = vpop.f32.mrb[0].mxu0
  %v3282 = vadd.f32 %v618, %v3281
  %v3283 = vpop.f32.mrb[0].mxu0
  %v3284 = vpop.f32.mrb[0].mxu0
  %v3285 = vadd.f32 %v618, %v3284
  %v3286 = vpop.f32.mrb[0].mxu0
  %3287 = vmatprep.mubr.bf16.mxu0 0
  %3288 = vmatmul.mubr.bf16.gmra.mrb[0].mxu0 %v2190
  %v3289 = vpop.f32.mrb[0].mxu0
  %v3290 = vadd.f32 %v618, %v3289
  %v3291 = vpop.f32.mrb[0].mxu0
  %v3292 = vpop.f32.mrb[0].mxu0
  %v3293 = vadd.f32 %v618, %v3292
  %v3294 = vpop.f32.mrb[0].mxu0
  %3295 = vmatprep.mubr.bf16.mxu0 0
  %3296 = vmatmul.mubr.bf16.gmra.mrb[0].mxu0 %v2193
  %v3297 = vpop.f32.mrb[0].mxu0
  %v3298 = vadd.f32 %v618, %v3297
  %v3299 = vpop.f32.mrb[0].mxu0
  %v3300 = vpop.f32.mrb[0].mxu0
  %v3301 = vadd.f32 %v618, %v3300
  %v3302 = vpop.f32.mrb[0].mxu0
  %3303 = vmatprep.mubr.bf16.mxu0 0
  %3304 = vmatmul.mubr.bf16.gmra.mrb[0].mxu0 %v2196
  %v3305 = vpop.f32.mrb[0].mxu0
  %v3306 = vadd.f32 %v618, %v3305
  %v3307 = vpop.f32.mrb[0].mxu0
  %v3308 = vpop.f32.mrb[0].mxu0
  %v3309 = vadd.f32 %v618, %v3308
  %v3310 = vpop.f32.mrb[0].mxu0
  %3311 = vmatprep.mubr.bf16.mxu0 0
  %3312 = vmatmul.mubr.bf16.gmra.mrb[0].mxu0 %v2199
  %v3313 = vpop.f32.mrb[0].mxu0
  %v3314 = vadd.f32 %v618, %v3313
  %v3315 = vpop.f32.mrb[0].mxu0
  %v3316 = vpop.f32.mrb[0].mxu0
  %v3317 = vadd.f32 %v618, %v3316
  %v3318 = vpop.f32.mrb[0].mxu0
  %3319 = vmatprep.mubr.bf16.mxu0 0
  %3320 = vmatmul.mubr.bf16.gmra.mrb[0].mxu0 %v2202
  %v3321 = vpop.f32.mrb[0].mxu0
  %v3322 = vadd.f32 %v618, %v3321
  %v3323 = vpop.f32.mrb[0].mxu0
  %v3324 = vpop.f32.mrb[0].mxu0
  %v3325 = vadd.f32 %v618, %v3324
  %v3326 = vpop.f32.mrb[0].mxu0
  %3327 = vmatprep.mubr.bf16.mxu0 0
  %3328 = vmatmul.mubr.bf16.gmra.mrb[0].mxu0 %v2205
  %v3329 = vpop.f32.mrb[0].mxu0
  %v3330 = vadd.f32 %v618, %v3329
  %v3331 = vpop.f32.mrb[0].mxu0
  %v3332 = vpop.f32.mrb[0].mxu0
  %v3333 = vadd.f32 %v618, %v3332
  %v3334 = vpop.f32.mrb[0].mxu0
  %3335 = vmatprep.mubr.bf16.mxu0 0
  %3336 = vmatmul.mubr.bf16.gmra.mrb[0].mxu0 %v2208
  %v3337 = vpop.f32.mrb[0].mxu0
  %v3338 = vadd.f32 %v618, %v3337
  %v3339 = vpop.f32.mrb[0].mxu0
  %v3340 = vpop.f32.mrb[0].mxu0
  %v3341 = vadd.f32 %v618, %v3340
  %v3342 = vpop.f32.mrb[0].mxu0
  %3343 = vmatprep.mubr.bf16.mxu0 0
  %3344 = vmatmul.mubr.bf16.gmra.mrb[0].mxu0 %v2211
  %v3345 = vpop.f32.mrb[0].mxu0
  %v3346 = vadd.f32 %v618, %v3345
  %v3347 = vpop.f32.mrb[0].mxu0
  %v3348 = vpop.f32.mrb[0].mxu0
  %v3349 = vadd.f32 %v618, %v3348
  %v3350 = vpop.f32.mrb[0].mxu0
  %3351 = vmatprep.mubr.bf16.mxu0 0
  %3352 = vmatmul.mubr.bf16.gmra.mrb[0].mxu0 %v2214
  %v3353 = vpop.f32.mrb[0].mxu0
  %v3354 = vadd.f32 %v618, %v3353
  %v3355 = vpop.f32.mrb[0].mxu0
  %v3356 = vpop.f32.mrb[0].mxu0
  %v3357 = vadd.f32 %v618, %v3356
  %v3358 = vpop.f32.mrb[0].mxu0
  %3359 = vmatprep.mubr.bf16.mxu0 0
  %3360 = vmatmul.mubr.bf16.gmra.mrb[0].mxu0 %v2217
  %v3361 = vpop.f32.mrb[0].mxu0
  %v3362 = vadd.f32 %v618, %v3361
  %v3363 = vpop.f32.mrb[0].mxu0
  %v3364 = vpop.f32.mrb[0].mxu0
  %v3365 = vadd.f32 %v618, %v3364
  %v3366 = vpop.f32.mrb[0].mxu0
  %3367 = vmatprep.mubr.bf16.mxu0 0
  %3368 = vmatmul.mubr.bf16.gmra.mrb[0].mxu0 %v2220
  %v3369 = vpop.f32.mrb[0].mxu0
  %v3370 = vadd.f32 %v618, %v3369
  %v3371 = vpop.f32.mrb[0].mxu0
  %v3372 = vpop.f32.mrb[0].mxu0
  %v3373 = vadd.f32 %v618, %v3372
  %v3374 = vpop.f32.mrb[0].mxu0
  %3375 = vmatprep.mubr.bf16.mxu0 0
  %3376 = vmatmul.mubr.bf16.gmra.mrb[0].mxu0 %v2223
  %v3377 = vpop.f32.mrb[0].mxu0
  %v3378 = vadd.f32 %v618, %v3377
  %v3379 = vpop.f32.mrb[0].mxu0
  %v3380 = vpop.f32.mrb[0].mxu0
  %v3381 = vadd.f32 %v618, %v3380
  %v3382 = vpop.f32.mrb[0].mxu0
  %3383 = vmatprep.mubr.bf16.mxu0 0
  %3384 = vmatmul.mubr.bf16.gmra.mrb[0].mxu0 %v2226
  %v3385 = vpop.f32.mrb[0].mxu0
  %v3386 = vadd.f32 %v618, %v3385
  %v3387 = vpop.f32.mrb[0].mxu0
  %v3388 = vpop.f32.mrb[0].mxu0
  %v3389 = vadd.f32 %v618, %v3388
  %v3390 = vpop.f32.mrb[0].mxu0
  %3391 = vmatprep.mubr.bf16.mxu0 0
  %3392 = vmatmul.mubr.bf16.gmra.mrb[0].mxu0 %v2229
  %v3393 = vpop.f32.mrb[0].mxu0
  %v3394 = vadd.f32 %v618, %v3393
  %v3395 = vpop.f32.mrb[0].mxu0
  %v3396 = vpop.f32.mrb[0].mxu0
  %v3397 = vadd.f32 %v618, %v3396
  %v3398 = vpop.f32.mrb[0].mxu0
  %3399 = vmatprep.mubr.bf16.mxu0 0
  %3400 = vmatmul.mubr.bf16.gmra.mrb[0].mxu0 %v2232
  %v3401 = vpop.f32.mrb[0].mxu0
  %v3402 = vadd.f32 %v618, %v3401
  %v3403 = vpop.f32.mrb[0].mxu0
  %v3404 = vpop.f32.mrb[0].mxu0
  %v3405 = vadd.f32 %v618, %v3404
  %v3406 = vpop.f32.mrb[0].mxu0
  %3407 = vmatprep.mubr.bf16.mxu0 0
  %3408 = vmatmul.mubr.bf16.gmra.mrb[0].mxu0 %v2235
  %v3409 = vpop.f32.mrb[0].mxu0
  %v3410 = vadd.f32 %v618, %v3409
  %v3411 = vpop.f32.mrb[0].mxu0
  %v3412 = vpop.f32.mrb[0].mxu0
  %v3413 = vadd.f32 %v618, %v3412
  %v3414 = vpop.f32.mrb[0].mxu0
  %3415 = vmatprep.mubr.bf16.mxu0 0
  %3416 = vmatmul.mubr.bf16.gmra.mrb[0].mxu0 %v2238
  %v3417 = vpop.f32.mrb[0].mxu0
  %v3418 = vadd.f32 %v618, %v3417
  %v3419 = vpop.f32.mrb[0].mxu0
  %v3420 = vpop.f32.mrb[0].mxu0
  %v3421 = vadd.f32 %v618, %v3420
  %v3422 = vpop.f32.mrb[0].mxu0
  %3423 = vmatprep.mubr.bf16.mxu0 0
  %3424 = vmatmul.mubr.bf16.gmra.mrb[0].mxu0 %v2241
  %v3425 = vpop.f32.mrb[0].mxu0
  %v3426 = vadd.f32 %v618, %v3425
  %v3427 = vpop.f32.mrb[0].mxu0
  %v3428 = vpop.f32.mrb[0].mxu0
  %v3429 = vadd.f32 %v618, %v3428
  %v3430 = vpop.f32.mrb[0].mxu0
  %3431 = vmatprep.mubr.bf16.mxu0 0
  %3432 = vmatmul.mubr.bf16.gmra.mrb[0].mxu0 %v2244
  %v3433 = vpop.f32.mrb[0].mxu0
  %v3434 = vadd.f32 %v618, %v3433
  %v3435 = vpop.f32.mrb[0].mxu0
  %v3436 = vpop.f32.mrb[0].mxu0
  %v3437 = vadd.f32 %v618, %v3436
  %v3438 = vpop.f32.mrb[0].mxu0
  %3439 = vmatprep.mubr.bf16.mxu0 0
  %3440 = vmatmul.mubr.bf16.gmra.mrb[0].mxu0 %v2247
  %v3441 = vpop.f32.mrb[0].mxu0
  %v3442 = vadd.f32 %v618, %v3441
  %v3443 = vpop.f32.mrb[0].mxu0
  %v3444 = vpop.f32.mrb[0].mxu0
  %v3445 = vadd.f32 %v618, %v3444
  %v3446 = vpop.f32.mrb[0].mxu0
  %3447 = vmatprep.mubr.bf16.mxu0 0
  %3448 = vmatmul.mubr.bf16.gmra.mrb[0].mxu0 %v2250
  %v3449 = vpop.f32.mrb[0].mxu0
  %v3450 = vadd.f32 %v618, %v3449
  %v3451 = vpop.f32.mrb[0].mxu0
  %v3452 = vpop.f32.mrb[0].mxu0
  %v3453 = vadd.f32 %v618, %v3452
  %v3454 = vpop.f32.mrb[0].mxu0
  %3455 = vmatprep.mubr.bf16.mxu0 0
  %3456 = vmatmul.mubr.bf16.gmra.mrb[0].mxu0 %v2253
  %v3457 = vpop.f32.mrb[0].mxu0
  %v3458 = vadd.f32 %v618, %v3457
  %v3459 = vpop.f32.mrb[0].mxu0
  %v3460 = vpop.f32.mrb[0].mxu0
  %v3461 = vadd.f32 %v618, %v3460
  %v3462 = vpop.f32.mrb[0].mxu0
  %3463 = vmatprep.mubr.bf16.mxu0 0
  %3464 = vmatmul.mubr.bf16.gmra.mrb[0].mxu0 %v2256
  %v3465 = vpop.f32.mrb[0].mxu0
  %v3466 = vadd.f32 %v618, %v3465
  %v3467 = vpop.f32.mrb[0].mxu0
  %v3468 = vpop.f32.mrb[0].mxu0
  %v3469 = vadd.f32 %v618, %v3468
  %v3470 = vpop.f32.mrb[0].mxu0
  %3471 = vmatprep.mubr.bf16.mxu0 0
  %3472 = vmatmul.mubr.bf16.gmra.mrb[0].mxu0 %v2259
  %v3473 = vpop.f32.mrb[0].mxu0
  %v3474 = vadd.f32 %v618, %v3473
  %v3475 = vpop.f32.mrb[0].mxu0
  %v3476 = vpop.f32.mrb[0].mxu0
  %v3477 = vadd.f32 %v618, %v3476
  %v3478 = vpop.f32.mrb[0].mxu0
  %3479 = vmatprep.mubr.bf16.mxu0 0
  %3480 = vmatmul.mubr.bf16.gmra.mrb[0].mxu0 %v2262
  %v3481 = vpop.f32.mrb[0].mxu0
  %v3482 = vadd.f32 %v618, %v3481
  %v3483 = vpop.f32.mrb[0].mxu0
  %v3484 = vpop.f32.mrb[0].mxu0
  %v3485 = vadd.f32 %v618, %v3484
  %v3486 = vpop.f32.mrb[0].mxu0
  %3487 = vmatprep.mubr.bf16.mxu0 0
  %3488 = vmatmul.mubr.bf16.gmra.mrb[0].mxu0 %v2265
  %v3489 = vpop.f32.mrb[0].mxu0
  %v3490 = vadd.f32 %v618, %v3489
  %v3491 = vpop.f32.mrb[0].mxu0
  %v3492 = vpop.f32.mrb[0].mxu0
  %v3493 = vadd.f32 %v618, %v3492
  %v3494 = vpop.f32.mrb[0].mxu0
  %3495 = vmatprep.mubr.bf16.mxu0 0
  %3496 = vmatmul.mubr.bf16.gmra.mrb[0].mxu0 %v2268
  %v3497 = vpop.f32.mrb[0].mxu0
  %v3498 = vadd.f32 %v618, %v3497
  %v3499 = vpop.f32.mrb[0].mxu0
  %v3500 = vpop.f32.mrb[0].mxu0
  %v3501 = vadd.f32 %v618, %v3500
  %v3502 = vpop.f32.mrb[0].mxu0
  %3503 = vmatprep.mubr.bf16.mxu0 0
  %3504 = vmatmul.mubr.bf16.gmra.mrb[0].mxu0 %v2271
  %v3505 = vpop.f32.mrb[0].mxu0
  %v3506 = vadd.f32 %v618, %v3505
  %v3507 = vpop.f32.mrb[0].mxu0
  %v3508 = vpop.f32.mrb[0].mxu0
  %v3509 = vadd.f32 %v618, %v3508
  %v3510 = vpop.f32.mrb[0].mxu0
  %3511 = vmatprep.mubr.bf16.mxu0 0
  %3512 = vmatmul.mubr.bf16.gmra.mrb[0].mxu0 %v2274
  %v3513 = vpop.f32.mrb[0].mxu0
  %v3514 = vadd.f32 %v618, %v3513
  %v3515 = vpop.f32.mrb[0].mxu0
  %v3516 = vpop.f32.mrb[0].mxu0
  %v3517 = vadd.f32 %v618, %v3516
  %v3518 = vpop.f32.mrb[0].mxu0
  %3519 = vmatprep.mubr.bf16.mxu0 0
  %3520 = vmatmul.mubr.bf16.gmra.mrb[0].mxu0 %v2277
  %v3521 = vpop.f32.mrb[0].mxu0
  %v3522 = vadd.f32 %v618, %v3521
  %v3523 = vpop.f32.mrb[0].mxu0
  %v3524 = vpop.f32.mrb[0].mxu0
  %v3525 = vadd.f32 %v618, %v3524
  %v3526 = vpop.f32.mrb[0].mxu0
  %3527 = vmatprep.mubr.bf16.mxu0 0
  %3528 = vmatmul.mubr.bf16.gmra.mrb[0].mxu0 %v2280
  %v3529 = vpop.f32.mrb[0].mxu0
  %v3530 = vadd.f32 %v618, %v3529
  %v3531 = vpop.f32.mrb[0].mxu0
  %v3532 = vpop.f32.mrb[0].mxu0
  %v3533 = vadd.f32 %v618, %v3532
  %v3534 = vpop.f32.mrb[0].mxu0
  %3535 = vmatprep.mubr.bf16.mxu0 0
  %3536 = vmatmul.mubr.bf16.gmra.mrb[0].mxu0 %v2283
  %v3537 = vpop.f32.mrb[0].mxu0
  %v3538 = vadd.f32 %v618, %v3537
  %v3539 = vpop.f32.mrb[0].mxu0
  %v3540 = vpop.f32.mrb[0].mxu0
  %v3541 = vadd.f32 %v618, %v3540
  %v3542 = vpop.f32.mrb[0].mxu0
  %3543 = vmatprep.mubr.bf16.mxu0 0
  %3544 = vmatmul.mubr.bf16.gmra.mrb[0].mxu0 %v2286
  %v3545 = vpop.f32.mrb[0].mxu0
  %v3546 = vadd.f32 %v618, %v3545
  %v3547 = vpop.f32.mrb[0].mxu0
  %v3548 = vpop.f32.mrb[0].mxu0
  %v3549 = vadd.f32 %v618, %v3548
  %v3550 = vpop.f32.mrb[0].mxu0
  %3551 = vmatprep.mubr.bf16.mxu0 0
  %3552 = vmatmul.mubr.bf16.gmra.mrb[0].mxu0 %v2289
  %v3553 = vpop.f32.mrb[0].mxu0
  %v3554 = vadd.f32 %v618, %v3553
  %v3555 = vpop.f32.mrb[0].mxu0
  %v3556 = vpop.f32.mrb[0].mxu0
  %v3557 = vadd.f32 %v618, %v3556
  %v3558 = vpop.f32.mrb[0].mxu0
  %3559 = vmatprep.mubr.bf16.mxu0 0
  %3560 = vmatmul.mubr.bf16.gmra.mrb[0].mxu0 %v2292
  %v3561 = vpop.f32.mrb[0].mxu0
  %v3562 = vadd.f32 %v618, %v3561
  %v3563 = vpop.f32.mrb[0].mxu0
  %v3564 = vpop.f32.mrb[0].mxu0
  %v3565 = vadd.f32 %v618, %v3564
  %v3566 = vpop.f32.mrb[0].mxu0
  %3567 = vmatprep.mubr.bf16.mxu0 0
  %3568 = vmatmul.mubr.bf16.gmra.mrb[0].mxu0 %v2295
  %v3569 = vpop.f32.mrb[0].mxu0
  %v3570 = vadd.f32 %v618, %v3569
  %v3571 = vpop.f32.mrb[0].mxu0
  %v3572 = vpop.f32.mrb[0].mxu0
  %v3573 = vadd.f32 %v618, %v3572
  %v3574 = vpop.f32.mrb[0].mxu0
  %3575 = vmatprep.mubr.bf16.mxu0 0
  %3576 = vmatmul.mubr.bf16.gmra.mrb[0].mxu0 %v2298
  %v3577 = vpop.f32.mrb[0].mxu0
  %v3578 = vadd.f32 %v618, %v3577
  %v3579 = vpop.f32.mrb[0].mxu0
  %v3580 = vpop.f32.mrb[0].mxu0
  %v3581 = vadd.f32 %v618, %v3580
  %v3582 = vpop.f32.mrb[0].mxu0
  %3583 = vmatprep.mubr.bf16.mxu0 0
  %3584 = vmatmul.mubr.bf16.gmra.mrb[0].mxu0 %v2301
  %v3585 = vpop.f32.mrb[0].mxu0
  %v3586 = vadd.f32 %v618, %v3585
  %v3587 = vpop.f32.mrb[0].mxu0
  %v3588 = vpop.f32.mrb[0].mxu0
  %v3589 = vadd.f32 %v618, %v3588
  %v3590 = vpop.f32.mrb[0].mxu0
  %3591 = vmatprep.mubr.bf16.mxu0 0
  %3592 = vmatmul.mubr.bf16.gmra.mrb[0].mxu0 %v2304
  %v3593 = vpop.f32.mrb[0].mxu0
  %v3594 = vadd.f32 %v618, %v3593
  %v3595 = vpop.f32.mrb[0].mxu0
  %v3596 = vpop.f32.mrb[0].mxu0
  %v3597 = vadd.f32 %v618, %v3596
  %v3598 = vpop.f32.mrb[0].mxu0
  %3599 = vmatprep.mubr.bf16.mxu0 0
  %3600 = vmatmul.mubr.bf16.gmra.mrb[0].mxu0 %v2307
  %v3601 = vpop.f32.mrb[0].mxu0
  %v3602 = vadd.f32 %v618, %v3601
  %v3603 = vpop.f32.mrb[0].mxu0
  %v3604 = vpop.f32.mrb[0].mxu0
  %v3605 = vadd.f32 %v618, %v3604
  %v3606 = vpop.f32.mrb[0].mxu0
  %3607 = vmatprep.mubr.bf16.mxu0 0
  %3608 = vmatmul.mubr.bf16.gmra.mrb[0].mxu0 %v2310
  %v3609 = vpop.f32.mrb[0].mxu0
  %v3610 = vadd.f32 %v618, %v3609
  %v3611 = vpop.f32.mrb[0].mxu0
  %v3612 = vpop.f32.mrb[0].mxu0
  %v3613 = vadd.f32 %v618, %v3612
  %v3614 = vpop.f32.mrb[0].mxu0
  %3615 = vmatprep.mubr.bf16.mxu0 0
  %3616 = vmatmul.mubr.bf16.gmra.mrb[0].mxu0 %v2313
  %v3617 = vpop.f32.mrb[0].mxu0
  %v3618 = vadd.f32 %v618, %v3617
  %v3619 = vpop.f32.mrb[0].mxu0
  %v3620 = vpop.f32.mrb[0].mxu0
  %v3621 = vadd.f32 %v618, %v3620
  %v3622 = vpop.f32.mrb[0].mxu0
  %3623 = vmatprep.mubr.bf16.mxu0 0
  %3624 = vmatmul.mubr.bf16.gmra.mrb[0].mxu0 %v2316
  %v3625 = vpop.f32.mrb[0].mxu0
  %v3626 = vadd.f32 %v618, %v3625
  %v3627 = vpop.f32.mrb[0].mxu0
  %v3628 = vpop.f32.mrb[0].mxu0
  %v3629 = vadd.f32 %v618, %v3628
  %v3630 = vpop.f32.mrb[0].mxu0
  %3631 = vmatprep.mubr.bf16.mxu0 0
  %3632 = vmatmul.mubr.bf16.gmra.mrb[0].mxu0 %v2319
  %v3633 = vpop.f32.mrb[0].mxu0
  %v3634 = vadd.f32 %v618, %v3633
  %v3635 = vpop.f32.mrb[0].mxu0
  %v3636 = vpop.f32.mrb[0].mxu0
  %v3637 = vadd.f32 %v618, %v3636
  %v3638 = vpop.f32.mrb[0].mxu0
  %3639 = vmatprep.mubr.bf16.mxu0 0
  %3640 = vmatmul.mubr.bf16.gmra.mrb[0].mxu0 %v2322
  %v3641 = vpop.f32.mrb[0].mxu0
  %v3642 = vadd.f32 %v618, %v3641
  %v3643 = vpop.f32.mrb[0].mxu0
  %v3644 = vpop.f32.mrb[0].mxu0
  %v3645 = vadd.f32 %v618, %v3644
  %v3646 = vpop.f32.mrb[0].mxu0
  %3647 = vmatprep.mubr.bf16.mxu0 0
  %3648 = vmatmul.mubr.bf16.gmra.mrb[0].mxu0 %v2325
  %v3649 = vpop.f32.mrb[0].mxu0
  %v3650 = vadd.f32 %v618, %v3649
  %v3651 = vpop.f32.mrb[0].mxu0
  %v3652 = vpop.f32.mrb[0].mxu0
  %v3653 = vadd.f32 %v618, %v3652
  %v3654 = vpop.f32.mrb[0].mxu0
  %3655 = vmatprep.mubr.bf16.mxu0 0
  %3656 = vmatmul.mubr.bf16.gmra.mrb[0].mxu0 %v2328
  %v3657 = vpop.f32.mrb[0].mxu0
  %v3658 = vadd.f32 %v618, %v3657
  %v3659 = vpop.f32.mrb[0].mxu0
  %v3660 = vpop.f32.mrb[0].mxu0
  %v3661 = vadd.f32 %v618, %v3660
  %v3662 = vpop.f32.mrb[0].mxu0
  %3663 = vmatprep.mubr.bf16.mxu0 0
  %3664 = vmatmul.mubr.bf16.gmra.mrb[0].mxu0 %v2331
  %v3665 = vpop.f32.mrb[0].mxu0
  %v3666 = vadd.f32 %v618, %v3665
  %v3667 = vpop.f32.mrb[0].mxu0
  %v3668 = vpop.f32.mrb[0].mxu0
  %v3669 = vadd.f32 %v618, %v3668
  %v3670 = vpop.f32.mrb[0].mxu0
  %3671 = vmatprep.mubr.bf16.mxu0 0
  %3672 = vmatmul.mubr.bf16.gmra.mrb[0].mxu0 %v2334
  %v3673 = vpop.f32.mrb[0].mxu0
  %v3674 = vadd.f32 %v618, %v3673
  %v3675 = vpop.f32.mrb[0].mxu0
  %v3676 = vpop.f32.mrb[0].mxu0
  %v3677 = vadd.f32 %v618, %v3676
  %v3678 = vpop.f32.mrb[0].mxu0
  %3679 = vmatprep.mubr.bf16.mxu0 0
  %3680 = vmatmul.mubr.bf16.gmra.mrb[0].mxu0 %v2337
  %v3681 = vpop.f32.mrb[0].mxu0
  %v3682 = vadd.f32 %v618, %v3681
  %v3683 = vpop.f32.mrb[0].mxu0
  %v3684 = vpop.f32.mrb[0].mxu0
  %v3685 = vadd.f32 %v618, %v3684
  %v3686 = vpop.f32.mrb[0].mxu0
  %3687 = vmatprep.mubr.bf16.mxu0 0
  %3688 = vmatmul.mubr.bf16.gmra.mrb[0].mxu0 %v2340
  %v3689 = vpop.f32.mrb[0].mxu0
  %v3690 = vadd.f32 %v618, %v3689
  %v3691 = vpop.f32.mrb[0].mxu0
  %v3692 = vpop.f32.mrb[0].mxu0
  %v3693 = vadd.f32 %v618, %v3692
  %v3694 = vpop.f32.mrb[0].mxu0
  %3695 = vmatprep.mubr.bf16.mxu0 0
  %3696 = vmatmul.mubr.bf16.gmra.mrb[0].mxu0 %v2343
  %v3697 = vpop.f32.mrb[0].mxu0
  %v3698 = vadd.f32 %v618, %v3697
  %v3699 = vpop.f32.mrb[0].mxu0
  %v3700 = vpop.f32.mrb[0].mxu0
  %v3701 = vadd.f32 %v618, %v3700
  %v3702 = vpop.f32.mrb[0].mxu0
  %3703 = vmatprep.mubr.bf16.mxu0 0
  %3704 = vmatmul.mubr.bf16.gmra.mrb[0].mxu0 %v2346
  %v3705 = vpop.f32.mrb[0].mxu0
  %v3706 = vadd.f32 %v618, %v3705
  %v3707 = vpop.f32.mrb[0].mxu0
  %v3708 = vpop.f32.mrb[0].mxu0
  %v3709 = vadd.f32 %v618, %v3708
  %v3710 = vpop.f32.mrb[0].mxu0
  %3711 = vmatprep.mubr.bf16.mxu0 0
  %3712 = vmatmul.mubr.bf16.gmra.mrb[0].mxu0 %v2349
  %v3713 = vpop.f32.mrb[0].mxu0
  %v3714 = vadd.f32 %v618, %v3713
  %v3715 = vpop.f32.mrb[0].mxu0
  %v3716 = vpop.f32.mrb[0].mxu0
  %v3717 = vadd.f32 %v618, %v3716
  %v3718 = vpop.f32.mrb[0].mxu0
  %3719 = vmatprep.mubr.bf16.mxu0 0
  %3720 = vmatmul.mubr.bf16.gmra.mrb[0].mxu0 %v2352
  %v3721 = vpop.f32.mrb[0].mxu0
  %v3722 = vadd.f32 %v618, %v3721
  %v3723 = vpop.f32.mrb[0].mxu0
  %v3724 = vpop.f32.mrb[0].mxu0
  %v3725 = vadd.f32 %v618, %v3724
  %v3726 = vpop.f32.mrb[0].mxu0
  %3727 = vmatprep.mubr.bf16.mxu0 0
  %3728 = vmatmul.mubr.bf16.gmra.mrb[0].mxu0 %v2355
  %v3729 = vpop.f32.mrb[0].mxu0
  %v3730 = vadd.f32 %v618, %v3729
  %v3731 = vpop.f32.mrb[0].mxu0
  %v3732 = vpop.f32.mrb[0].mxu0
  %v3733 = vadd.f32 %v618, %v3732
  %v3734 = vpop.f32.mrb[0].mxu0
  %3735 = vmatprep.mubr.bf16.mxu0 0
  %3736 = vmatmul.mubr.bf16.gmra.mrb[0].mxu0 %v2358
  %v3737 = vpop.f32.mrb[0].mxu0
  %v3738 = vadd.f32 %v618, %v3737
  %v3739 = vpop.f32.mrb[0].mxu0
  %v3740 = vpop.f32.mrb[0].mxu0
  %v3741 = vadd.f32 %v618, %v3740
  %v3742 = vpop.f32.mrb[0].mxu0
  %3743 = vmatprep.mubr.bf16.mxu0 0
  %3744 = vmatmul.mubr.bf16.gmra.mrb[0].mxu0 %v2361
  %v3745 = vpop.f32.mrb[0].mxu0
  %v3746 = vadd.f32 %v618, %v3745
  %v3747 = vpop.f32.mrb[0].mxu0
  %v3748 = vpop.f32.mrb[0].mxu0
  %v3749 = vadd.f32 %v618, %v3748
  %v3750 = vpop.f32.mrb[0].mxu0
  %3751 = vmatprep.mubr.bf16.mxu0 0
  %3752 = vmatmul.mubr.bf16.gmra.mrb[0].mxu0 %v2364
  %v3753 = vpop.f32.mrb[0].mxu0
  %v3754 = vadd.f32 %v618, %v3753
  %v3755 = vpop.f32.mrb[0].mxu0
  %v3756 = vpop.f32.mrb[0].mxu0
  %v3757 = vadd.f32 %v618, %v3756
  %v3758 = vpop.f32.mrb[0].mxu0
  %3759 = vmatprep.mubr.bf16.mxu0 0
  %3760 = vmatmul.mubr.bf16.gmra.mrb[0].mxu0 %v2367
  %v3761 = vpop.f32.mrb[0].mxu0
  %v3762 = vadd.f32 %v618, %v3761
  %v3763 = vpop.f32.mrb[0].mxu0
  %v3764 = vpop.f32.mrb[0].mxu0
  %v3765 = vadd.f32 %v618, %v3764
  %v3766 = vpop.f32.mrb[0].mxu0
  %3767 = vmatprep.mubr.bf16.mxu0 0
  %3768 = vmatmul.mubr.bf16.gmra.mrb[0].mxu0 %v2370
  %v3769 = vpop.f32.mrb[0].mxu0
  %v3770 = vadd.f32 %v618, %v3769
  %v3771 = vpop.f32.mrb[0].mxu0
  %v3772 = vpop.f32.mrb[0].mxu0
  %v3773 = vadd.f32 %v618, %v3772
  %v3774 = vpop.f32.mrb[0].mxu0
  %3775 = vmatprep.mubr.bf16.mxu0 0
  %3776 = vmatmul.mubr.bf16.gmra.mrb[0].mxu0 %v2373
  %v3777 = vpop.f32.mrb[0].mxu0
  %v3778 = vadd.f32 %v618, %v3777
  %v3779 = vpop.f32.mrb[0].mxu0
  %v3780 = vpop.f32.mrb[0].mxu0
  %v3781 = vadd.f32 %v618, %v3780
  %v3782 = vpop.f32.mrb[0].mxu0
  %3783 = vmatprep.mubr.bf16.mxu0 0
  %3784 = vmatmul.mubr.bf16.gmra.mrb[0].mxu0 %v2376
  %v3785 = vpop.f32.mrb[0].mxu0
  %v3786 = vadd.f32 %v618, %v3785
  %v3787 = vpop.f32.mrb[0].mxu0
  %v3788 = vpop.f32.mrb[0].mxu0
  %v3789 = vadd.f32 %v618, %v3788
  %v3790 = vpop.f32.mrb[0].mxu0
  %3791 = vmatprep.mubr.bf16.mxu0 0
  %3792 = vmatmul.mubr.bf16.gmra.mrb[0].mxu0 %v2379
  %v3793 = vpop.f32.mrb[0].mxu0
  %v3794 = vadd.f32 %v618, %v3793
  %v3795 = vpop.f32.mrb[0].mxu0
  %v3796 = vpop.f32.mrb[0].mxu0
  %v3797 = vadd.f32 %v618, %v3796
  %v3798 = vpop.f32.mrb[0].mxu0
  %3799 = vmatprep.mubr.bf16.mxu0 0
  %3800 = vmatmul.mubr.bf16.gmra.mrb[0].mxu0 %v2382
  %v3801 = vpop.f32.mrb[0].mxu0
  %v3802 = vadd.f32 %v618, %v3801
  %v3803 = vpop.f32.mrb[0].mxu0
  %v3804 = vpop.f32.mrb[0].mxu0
  %v3805 = vadd.f32 %v618, %v3804
  %v3806 = vpop.f32.mrb[0].mxu0
  %3807 = vmatprep.mubr.bf16.mxu0 0
  %3808 = vmatmul.mubr.bf16.gmra.mrb[0].mxu0 %v2385
  %v3809 = vpop.f32.mrb[0].mxu0
  %v3810 = vadd.f32 %v618, %v3809
  %v3811 = vpop.f32.mrb[0].mxu0
  %v3812 = vpop.f32.mrb[0].mxu0
  %v3813 = vadd.f32 %v618, %v3812
  %v3814 = vpop.f32.mrb[0].mxu0
  %3815 = vmatprep.mubr.bf16.mxu0 0
  %3816 = vmatmul.mubr.bf16.gmra.mrb[0].mxu0 %v2388
  %v3817 = vpop.f32.mrb[0].mxu0
  %v3818 = vadd.f32 %v618, %v3817
  %v3819 = vpop.f32.mrb[0].mxu0
  %v3820 = vpop.f32.mrb[0].mxu0
  %v3821 = vadd.f32 %v618, %v3820
  %v3822 = vpop.f32.mrb[0].mxu0
  %3823 = vmatprep.mubr.bf16.mxu0 0
  %3824 = vmatmul.mubr.bf16.gmra.mrb[0].mxu0 %v2391
  %v3825 = vpop.f32.mrb[0].mxu0
  %v3826 = vadd.f32 %v618, %v3825
  %v3827 = vpop.f32.mrb[0].mxu0
  %v3828 = vpop.f32.mrb[0].mxu0
  %v3829 = vadd.f32 %v618, %v3828
  %v3830 = vpop.f32.mrb[0].mxu0
  %3831 = vmatprep.mubr.bf16.mxu0 0
  %3832 = vmatmul.mubr.bf16.gmra.mrb[0].mxu0 %v2394
  %v3833 = vpop.f32.mrb[0].mxu0
  %v3834 = vadd.f32 %v618, %v3833
  %v3835 = vpop.f32.mrb[0].mxu0
  %v3836 = vpop.f32.mrb[0].mxu0
  %v3837 = vadd.f32 %v618, %v3836
  %v3838 = vpop.f32.mrb[0].mxu0
  %3839 = vmatprep.mubr.bf16.mxu0 0
  %3840 = vmatmul.mubr.bf16.gmra.mrb[0].mxu0 %v2397
  %v3841 = vpop.f32.mrb[0].mxu0
  %v3842 = vadd.f32 %v618, %v3841
  %v3843 = vpop.f32.mrb[0].mxu0
  %v3844 = vpop.f32.mrb[0].mxu0
  %v3845 = vadd.f32 %v618, %v3844
  %v3846 = vpop.f32.mrb[0].mxu0
  %3847 = vmatprep.mubr.bf16.mxu0 0
  %3848 = vmatmul.mubr.bf16.gmra.mrb[0].mxu0 %v2400
  %v3849 = vpop.f32.mrb[0].mxu0
  %v3850 = vadd.f32 %v618, %v3849
  %v3851 = vpop.f32.mrb[0].mxu0
  %v3852 = vpop.f32.mrb[0].mxu0
  %v3853 = vadd.f32 %v618, %v3852
  %v3854 = vpop.f32.mrb[0].mxu0
  %3855 = vmatprep.mubr.bf16.mxu0 0
  %3856 = vmatmul.mubr.bf16.gmra.mrb[0].mxu0 %v2403
  %v3857 = vpop.f32.mrb[0].mxu0
  %v3858 = vadd.f32 %v618, %v3857
  %v3859 = vpop.f32.mrb[0].mxu0
  %v3860 = vpop.f32.mrb[0].mxu0
  %v3861 = vadd.f32 %v618, %v3860
  %v3862 = vpop.f32.mrb[0].mxu0
  %3863 = vmatprep.mubr.bf16.mxu0 0
  %3864 = vmatmul.mubr.bf16.gmra.mrb[0].mxu0 %v2406
  %v3865 = vpop.f32.mrb[0].mxu0
  %v3866 = vadd.f32 %v618, %v3865
  %v3867 = vpop.f32.mrb[0].mxu0
  %v3868 = vpop.f32.mrb[0].mxu0
  %v3869 = vadd.f32 %v618, %v3868
  %v3870 = vpop.f32.mrb[0].mxu0
  %3871 = vmatprep.mubr.bf16.mxu0 0
  %3872 = vmatmul.mubr.bf16.gmra.mrb[0].mxu0 %v2409
  %v3873 = vpop.f32.mrb[0].mxu0
  %v3874 = vadd.f32 %v618, %v3873
  %v3875 = vpop.f32.mrb[0].mxu0
  %v3876 = vpop.f32.mrb[0].mxu0
  %v3877 = vadd.f32 %v618, %v3876
  %v3878 = vpop.f32.mrb[0].mxu0
  %3879 = vmatprep.mubr.bf16.mxu0 0
  %3880 = vmatmul.mubr.bf16.gmra.mrb[0].mxu0 %v2412
  %v3881 = vpop.f32.mrb[0].mxu0
  %v3882 = vadd.f32 %v618, %v3881
  %v3883 = vpop.f32.mrb[0].mxu0
  %v3884 = vpop.f32.mrb[0].mxu0
  %v3885 = vadd.f32 %v618, %v3884
  %v3886 = vpop.f32.mrb[0].mxu0
  %3887 = vmatprep.mubr.bf16.mxu0 0
  %3888 = vmatmul.mubr.bf16.gmra.mrb[0].mxu0 %v2415
  %v3889 = vpop.f32.mrb[0].mxu0
  %v3890 = vadd.f32 %v618, %v3889
  %v3891 = vpop.f32.mrb[0].mxu0
  %v3892 = vpop.f32.mrb[0].mxu0
  %v3893 = vadd.f32 %v618, %v3892
  %v3894 = vpop.f32.mrb[0].mxu0
  %3895 = vmatprep.mubr.bf16.mxu0 0
  %3896 = vmatmul.mubr.bf16.gmra.mrb[0].mxu0 %v2418
  %v3897 = vpop.f32.mrb[0].mxu0
  %v3898 = vadd.f32 %v618, %v3897
  %v3899 = vpop.f32.mrb[0].mxu0
  %v3900 = vpop.f32.mrb[0].mxu0
  %v3901 = vadd.f32 %v618, %v3900
  %v3902 = vpop.f32.mrb[0].mxu0
  %3903 = vmatprep.mubr.bf16.mxu0 0
  %3904 = vmatmul.mubr.bf16.gmra.mrb[0].mxu0 %v2421
  %v3905 = vpop.f32.mrb[0].mxu0
  %v3906 = vadd.f32 %v618, %v3905
  %v3907 = vpop.f32.mrb[0].mxu0
  %v3908 = vpop.f32.mrb[0].mxu0
  %v3909 = vadd.f32 %v618, %v3908
  %v3910 = vpop.f32.mrb[0].mxu0
  %3911 = vmatprep.mubr.bf16.mxu0 0
  %3912 = vmatmul.mubr.bf16.gmra.mrb[0].mxu0 %v2424
  %v3913 = vpop.f32.mrb[0].mxu0
  %v3914 = vadd.f32 %v618, %v3913
  %v3915 = vpop.f32.mrb[0].mxu0
  %v3916 = vpop.f32.mrb[0].mxu0
  %v3917 = vadd.f32 %v618, %v3916
  %v3918 = vpop.f32.mrb[0].mxu0
  %3919 = vmatprep.mubr.bf16.mxu0 0
  %3920 = vmatmul.mubr.bf16.gmra.mrb[0].mxu0 %v2427
  %v3921 = vpop.f32.mrb[0].mxu0
  %v3922 = vadd.f32 %v618, %v3921
  %v3923 = vpop.f32.mrb[0].mxu0
  %v3924 = vpop.f32.mrb[0].mxu0
  %v3925 = vadd.f32 %v618, %v3924
  %v3926 = vpop.f32.mrb[0].mxu0
  %3927 = vmatprep.mubr.bf16.mxu0 0
  %3928 = vmatmul.mubr.bf16.gmra.mrb[0].mxu0 %v2430
  %v3929 = vpop.f32.mrb[0].mxu0
  %v3930 = vadd.f32 %v618, %v3929
  %v3931 = vpop.f32.mrb[0].mxu0
  %v3932 = vpop.f32.mrb[0].mxu0
  %v3933 = vadd.f32 %v618, %v3932
  %v3934 = vpop.f32.mrb[0].mxu0
  %3935 = vmatprep.mubr.bf16.mxu0 0
  %3936 = vmatmul.mubr.bf16.gmra.mrb[0].mxu0 %v2433
  %v3937 = vpop.f32.mrb[0].mxu0
  %v3938 = vadd.f32 %v618, %v3937
  %v3939 = vpop.f32.mrb[0].mxu0
  %v3940 = vpop.f32.mrb[0].mxu0
  %v3941 = vadd.f32 %v618, %v3940
  %v3942 = vpop.f32.mrb[0].mxu0
  %3943 = vmatprep.mubr.bf16.mxu0 0
  %3944 = vmatmul.mubr.bf16.gmra.mrb[0].mxu0 %v2436
  %v3945 = vpop.f32.mrb[0].mxu0
  %v3946 = vadd.f32 %v618, %v3945
  %v3947 = vpop.f32.mrb[0].mxu0
  %v3948 = vpop.f32.mrb[0].mxu0
  %v3949 = vadd.f32 %v618, %v3948
  %v3950 = vpop.f32.mrb[0].mxu0
  %3951 = vmatprep.mubr.bf16.mxu0 0
  %3952 = vmatmul.mubr.bf16.gmra.mrb[0].mxu0 %v2439
  %v3953 = vpop.f32.mrb[0].mxu0
  %v3954 = vadd.f32 %v618, %v3953
  %v3955 = vpop.f32.mrb[0].mxu0
  %v3956 = vpop.f32.mrb[0].mxu0
  %v3957 = vadd.f32 %v618, %v3956
  %v3958 = vpop.f32.mrb[0].mxu0
  %3959 = vmatprep.mubr.bf16.mxu0 0
  %3960 = vmatmul.mubr.bf16.gmra.mrb[0].mxu0 %v2442
  %v3961 = vpop.f32.mrb[0].mxu0
  %v3962 = vadd.f32 %v618, %v3961
  %v3963 = vpop.f32.mrb[0].mxu0
  %v3964 = vpop.f32.mrb[0].mxu0
  %v3965 = vadd.f32 %v618, %v3964
  %v3966 = vpop.f32.mrb[0].mxu0
  %3967 = vmatprep.mubr.bf16.mxu0 0
  %3968 = vmatmul.mubr.bf16.gmra.mrb[0].mxu0 %v2445
  %v3969 = vpop.f32.mrb[0].mxu0
  %v3970 = vadd.f32 %v618, %v3969
  %v3971 = vpop.f32.mrb[0].mxu0
  %v3972 = vpop.f32.mrb[0].mxu0
  %v3973 = vadd.f32 %v618, %v3972
  %v3974 = vpop.f32.mrb[0].mxu0
  %3975 = vmatprep.mubr.bf16.mxu0 0
  %3976 = vmatmul.mubr.bf16.gmra.mrb[0].mxu0 %v2448
  %v3977 = vpop.f32.mrb[0].mxu0
  %v3978 = vadd.f32 %v618, %v3977
  %v3979 = vpop.f32.mrb[0].mxu0
  %v3980 = vpop.f32.mrb[0].mxu0
  %v3981 = vadd.f32 %v618, %v3980
  %v3982 = vpop.f32.mrb[0].mxu0
  %3983 = vmatprep.mubr.bf16.mxu0 0
  %3984 = vmatmul.mubr.bf16.gmra.mrb[0].mxu0 %v2451
  %v3985 = vpop.f32.mrb[0].mxu0
  %v3986 = vadd.f32 %v618, %v3985
  %v3987 = vpop.f32.mrb[0].mxu0
  %v3988 = vpop.f32.mrb[0].mxu0
  %v3989 = vadd.f32 %v618, %v3988
  %v3990 = vpop.f32.mrb[0].mxu0
  %3991 = vmatprep.mubr.bf16.mxu0 0
  %3992 = vmatmul.mubr.bf16.gmra.mrb[0].mxu0 %v2454
  %v3993 = vpop.f32.mrb[0].mxu0
  %v3994 = vadd.f32 %v618, %v3993
  %v3995 = vpop.f32.mrb[0].mxu0
  %v3996 = vpop.f32.mrb[0].mxu0
  %v3997 = vadd.f32 %v618, %v3996
  %v3998 = vpop.f32.mrb[0].mxu0
  %3999 = vmatprep.mubr.bf16.mxu0 0
  %4000 = vmatmul.mubr.bf16.gmra.mrb[0].mxu0 %v2457
  %v4001 = vpop.f32.mrb[0].mxu0
  %v4002 = vadd.f32 %v618, %v4001
  %v4003 = vpop.f32.mrb[0].mxu0
  %v4004 = vpop.f32.mrb[0].mxu0
  %v4005 = vadd.f32 %v618, %v4004
  %v4006 = vpop.f32.mrb[0].mxu0
  %4007 = vmatprep.mubr.bf16.mxu0 0
  %4008 = vmatmul.mubr.bf16.gmra.mrb[0].mxu0 %v2460
  %v4009 = vpop.f32.mrb[0].mxu0
  %v4010 = vadd.f32 %v618, %v4009
  %v4011 = vpop.f32.mrb[0].mxu0
  %v4012 = vpop.f32.mrb[0].mxu0
  %v4013 = vadd.f32 %v618, %v4012
  %v4014 = vpop.f32.mrb[0].mxu0
  %4015 = vmatprep.mubr.bf16.mxu0 0
  %4016 = vmatmul.mubr.bf16.gmra.mrb[0].mxu0 %v2463
  %v4017 = vpop.f32.mrb[0].mxu0
  %v4018 = vadd.f32 %v618, %v4017
  %v4019 = vpop.f32.mrb[0].mxu0
  %v4020 = vpop.f32.mrb[0].mxu0
  %v4021 = vadd.f32 %v618, %v4020
  %v4022 = vpop.f32.mrb[0].mxu0
  %4023 = vmatprep.mubr.bf16.mxu0 0
  %4024 = vmatmul.mubr.bf16.gmra.mrb[0].mxu0 %v2466
  %v4025 = vpop.f32.mrb[0].mxu0
  %v4026 = vadd.f32 %v618, %v4025
  %v4027 = vpop.f32.mrb[0].mxu0
  %v4028 = vpop.f32.mrb[0].mxu0
  %v4029 = vadd.f32 %v618, %v4028
  %v4030 = vpop.f32.mrb[0].mxu0
  %4031 = vmatprep.mubr.bf16.mxu0 0
  %4032 = vmatmul.mubr.bf16.gmra.mrb[0].mxu0 %v2469
  %v4033 = vpop.f32.mrb[0].mxu0
  %v4034 = vadd.f32 %v618, %v4033
  %v4035 = vpop.f32.mrb[0].mxu0
  %v4036 = vpop.f32.mrb[0].mxu0
  %v4037 = vadd.f32 %v618, %v4036
  %v4038 = vpop.f32.mrb[0].mxu0
  %4039 = vmatprep.mubr.bf16.mxu0 0
  %4040 = vmatmul.mubr.bf16.gmra.mrb[0].mxu0 %v2472
  %v4041 = vpop.f32.mrb[0].mxu0
  %v4042 = vadd.f32 %v618, %v4041
  %v4043 = vpop.f32.mrb[0].mxu0
  %v4044 = vpop.f32.mrb[0].mxu0
  %v4045 = vadd.f32 %v618, %v4044
  %v4046 = vpop.f32.mrb[0].mxu0
  %4047 = vmatprep.mubr.bf16.mxu0 0
  %4048 = vmatmul.mubr.bf16.gmra.mrb[0].mxu0 %v2475
  %v4049 = vpop.f32.mrb[0].mxu0
  %v4050 = vadd.f32 %v618, %v4049
  %v4051 = vpop.f32.mrb[0].mxu0
  %v4052 = vpop.f32.mrb[0].mxu0
  %v4053 = vadd.f32 %v618, %v4052
  %v4054 = vpop.f32.mrb[0].mxu0
  %4055 = vmatprep.mubr.bf16.mxu0 0
  %4056 = vmatmul.mubr.bf16.gmra.mrb[0].mxu0 %v2478
  %v4057 = vpop.f32.mrb[0].mxu0
  %v4058 = vadd.f32 %v618, %v4057
  %v4059 = vpop.f32.mrb[0].mxu0
  %v4060 = vpop.f32.mrb[0].mxu0
  %v4061 = vadd.f32 %v618, %v4060
  %v4062 = vpop.f32.mrb[0].mxu0
  %4063 = vmatprep.mubr.bf16.mxu0 0
  %4064 = vmatmul.mubr.bf16.gmra.mrb[0].mxu0 %v2481
  %v4065 = vpop.f32.mrb[0].mxu0
  %v4066 = vadd.f32 %v618, %v4065
  %v4067 = vpop.f32.mrb[0].mxu0
  %v4068 = vpop.f32.mrb[0].mxu0
  %v4069 = vadd.f32 %v618, %v4068
  %v4070 = vpop.f32.mrb[0].mxu0
  %4071 = vmatprep.mubr.bf16.mxu0 0
  %4072 = vmatmul.mubr.bf16.gmra.mrb[0].mxu0 %v2484
  %v4073 = vpop.f32.mrb[0].mxu0
  %v4074 = vadd.f32 %v618, %v4073
  %v4075 = vpop.f32.mrb[0].mxu0
  %v4076 = vpop.f32.mrb[0].mxu0
  %v4077 = vadd.f32 %v618, %v4076
  %v4078 = vpop.f32.mrb[0].mxu0
  %4079 = vmatprep.mubr.bf16.mxu0 0
  %4080 = vmatmul.mubr.bf16.gmra.mrb[0].mxu0 %v2487
  %v4081 = vpop.f32.mrb[0].mxu0
  %v4082 = vadd.f32 %v618, %v4081
  %v4083 = vpop.f32.mrb[0].mxu0
  %v4084 = vpop.f32.mrb[0].mxu0
  %v4085 = vadd.f32 %v618, %v4084
  %v4086 = vpop.f32.mrb[0].mxu0
  %4087 = vmatprep.mubr.bf16.mxu0 0
  %4088 = vmatmul.mubr.bf16.gmra.mrb[0].mxu0 %v2490
  %v4089 = vpop.f32.mrb[0].mxu0
  %v4090 = vadd.f32 %v618, %v4089
  %v4091 = vpop.f32.mrb[0].mxu0
  %v4092 = vpop.f32.mrb[0].mxu0
  %v4093 = vadd.f32 %v618, %v4092
  %v4094 = vpop.f32.mrb[0].mxu0
  %4095 = vmatprep.mubr.bf16.mxu0 0
  %4096 = vmatmul.mubr.bf16.gmra.mrb[0].mxu0 %v2493
  %v4097 = vpop.f32.mrb[0].mxu0
  %v4098 = vadd.f32 %v618, %v4097
  %v4099 = vpop.f32.mrb[0].mxu0
  %v4100 = vpop.f32.mrb[0].mxu0
  %v4101 = vadd.f32 %v618, %v4100
  %v4102 = vpop.f32.mrb[0].mxu0
  %4103 = vmatprep.mubr.bf16.mxu0 0
  %4104 = vmatmul.mubr.bf16.gmra.mrb[0].mxu0 %v2496
  %v4105 = vpop.f32.mrb[0].mxu0
  %v4106 = vadd.f32 %v618, %v4105
  %v4107 = vpop.f32.mrb[0].mxu0
  %v4108 = vpop.f32.mrb[0].mxu0
  %v4109 = vadd.f32 %v618, %v4108
  %v4110 = vpop.f32.mrb[0].mxu0
  %4111 = vmatprep.mubr.bf16.mxu0 0
  %4112 = vmatmul.mubr.bf16.gmra.mrb[0].mxu0 %v2499
  %v4113 = vpop.f32.mrb[0].mxu0
  %v4114 = vadd.f32 %v618, %v4113
  %v4115 = vpop.f32.mrb[0].mxu0
  %v4116 = vpop.f32.mrb[0].mxu0
  %v4117 = vadd.f32 %v618, %v4116
  %v4118 = vpop.f32.mrb[0].mxu0
  %4119 = vmatprep.mubr.bf16.mxu0 0
  %4120 = vmatmul.mubr.bf16.gmra.mrb[0].mxu0 %v2502
  %v4121 = vpop.f32.mrb[0].mxu0
  %v4122 = vadd.f32 %v618, %v4121
  %v4123 = vpop.f32.mrb[0].mxu0
  %v4124 = vpop.f32.mrb[0].mxu0
  %v4125 = vadd.f32 %v618, %v4124
  %v4126 = vpop.f32.mrb[0].mxu0
  %4127 = vmatprep.mubr.bf16.mxu0 0
  %4128 = vmatmul.mubr.bf16.gmra.mrb[0].mxu0 %v2505
  %v4129 = vpop.f32.mrb[0].mxu0
  %v4130 = vadd.f32 %v618, %v4129
  %v4131 = vpop.f32.mrb[0].mxu0
  %v4132 = vpop.f32.mrb[0].mxu0
  %v4133 = vadd.f32 %v618, %v4132
  %v4134 = vpop.f32.mrb[0].mxu0
  %4135 = vmatprep.mubr.bf16.mxu0 0
  %4136 = vmatmul.mubr.bf16.gmra.mrb[0].mxu0 %v2508
  %v4137 = vpop.f32.mrb[0].mxu0
  %v4138 = vadd.f32 %v618, %v4137
  %v4139 = vpop.f32.mrb[0].mxu0
  %v4140 = vpop.f32.mrb[0].mxu0
  %v4141 = vadd.f32 %v618, %v4140
  %v4142 = vpop.f32.mrb[0].mxu0
  %4143 = vmatprep.mubr.bf16.mxu0 0
  %4144 = vmatmul.mubr.bf16.gmra.mrb[0].mxu0 %v2511
  %v4145 = vpop.f32.mrb[0].mxu0
  %v4146 = vadd.f32 %v618, %v4145
  %v4147 = vpop.f32.mrb[0].mxu0
  %v4148 = vpop.f32.mrb[0].mxu0
  %v4149 = vadd.f32 %v618, %v4148
  %v4150 = vpop.f32.mrb[0].mxu0
  %4151 = vmatprep.mubr.bf16.mxu0 0
  %4152 = vmatmul.mubr.bf16.gmra.mrb[0].mxu0 %v2514
  %v4153 = vpop.f32.mrb[0].mxu0
  %v4154 = vadd.f32 %v618, %v4153
  %v4155 = vpop.f32.mrb[0].mxu0
  %v4156 = vpop.f32.mrb[0].mxu0
  %v4157 = vadd.f32 %v618, %v4156
  %v4158 = vpop.f32.mrb[0].mxu0
  %4159 = vmatprep.mubr.bf16.mxu0 0
  %4160 = vmatmul.mubr.bf16.gmra.mrb[0].mxu0 %v2517
  %v4161 = vpop.f32.mrb[0].mxu0
  %v4162 = vadd.f32 %v618, %v4161
  %v4163 = vpop.f32.mrb[0].mxu0
  %v4164 = vpop.f32.mrb[0].mxu0
  %v4165 = vadd.f32 %v618, %v4164
  %v4166 = vpop.f32.mrb[0].mxu0
  %4167 = vmatprep.mubr.bf16.mxu0 0
  %4168 = vmatmul.mubr.bf16.gmra.mrb[0].mxu0 %v2520
  %v4169 = vpop.f32.mrb[0].mxu0
  %v4170 = vadd.f32 %v618, %v4169
  %v4171 = vpop.f32.mrb[0].mxu0
  %v4172 = vpop.f32.mrb[0].mxu0
  %v4173 = vadd.f32 %v618, %v4172
  %v4174 = vpop.f32.mrb[0].mxu0
  %4175 = vmatprep.mubr.bf16.mxu0 0
  %4176 = vmatmul.mubr.bf16.gmra.mrb[0].mxu0 %v2523
  %v4177 = vpop.f32.mrb[0].mxu0
  %v4178 = vadd.f32 %v618, %v4177
  %v4179 = vpop.f32.mrb[0].mxu0
  %v4180 = vpop.f32.mrb[0].mxu0
  %v4181 = vadd.f32 %v618, %v4180
  %v4182 = vpop.f32.mrb[0].mxu0
  %4183 = vmatprep.mubr.bf16.mxu0 0
  %4184 = vmatmul.mubr.bf16.gmra.mrb[0].mxu0 %v2526
  %v4185 = vpop.f32.mrb[0].mxu0
  %v4186 = vadd.f32 %v618, %v4185
  %v4187 = vpop.f32.mrb[0].mxu0
  %v4188 = vpop.f32.mrb[0].mxu0
  %v4189 = vadd.f32 %v618, %v4188
  %v4190 = vpop.f32.mrb[0].mxu0
  %4191 = vmatprep.mubr.bf16.mxu0 0
  %4192 = vmatmul.mubr.bf16.gmra.mrb[0].mxu0 %v2529
  %v4193 = vpop.f32.mrb[0].mxu0
  %v4194 = vadd.f32 %v618, %v4193
  %v4195 = vpop.f32.mrb[0].mxu0
  %v4196 = vpop.f32.mrb[0].mxu0
  %v4197 = vadd.f32 %v618, %v4196
  %v4198 = vpop.f32.mrb[0].mxu0
  %4199 = vmatprep.mubr.bf16.mxu0 0
  %4200 = vmatmul.mubr.bf16.gmra.mrb[0].mxu0 %v2532
  %v4201 = vpop.f32.mrb[0].mxu0
  %v4202 = vadd.f32 %v618, %v4201
  %v4203 = vpop.f32.mrb[0].mxu0
  %v4204 = vpop.f32.mrb[0].mxu0
  %v4205 = vadd.f32 %v618, %v4204
  %v4206 = vpop.f32.mrb[0].mxu0
  %4207 = vmatprep.mubr.bf16.mxu0 0
  %4208 = vmatmul.mubr.bf16.gmra.mrb[0].mxu0 %v2535
  %v4209 = vpop.f32.mrb[0].mxu0
  %v4210 = vadd.f32 %v618, %v4209
  %v4211 = vpop.f32.mrb[0].mxu0
  %v4212 = vpop.f32.mrb[0].mxu0
  %v4213 = vadd.f32 %v618, %v4212
  %v4214 = vpop.f32.mrb[0].mxu0
  %4215 = vmatprep.mubr.bf16.mxu0 0
  %4216 = vmatmul.mubr.bf16.gmra.mrb[0].mxu0 %v2538
  %v4217 = vpop.f32.mrb[0].mxu0
  %v4218 = vadd.f32 %v618, %v4217
  %v4219 = vpop.f32.mrb[0].mxu0
  %v4220 = vpop.f32.mrb[0].mxu0
  %v4221 = vadd.f32 %v618, %v4220
  %v4222 = vpop.f32.mrb[0].mxu0
  %4223 = vmatprep.mubr.bf16.mxu0 0
  %4224 = vmatmul.mubr.bf16.gmra.mrb[0].mxu0 %v2541
  %v4225 = vpop.f32.mrb[0].mxu0
  %v4226 = vadd.f32 %v618, %v4225
  %v4227 = vpop.f32.mrb[0].mxu0
  %v4228 = vpop.f32.mrb[0].mxu0
  %v4229 = vadd.f32 %v618, %v4228
  %v4230 = vpop.f32.mrb[0].mxu0
  %4231 = vmatprep.mubr.bf16.mxu0 0
  %4232 = vmatmul.mubr.bf16.gmra.mrb[0].mxu0 %v2544
  %v4233 = vpop.f32.mrb[0].mxu0
  %v4234 = vadd.f32 %v618, %v4233
  %v4235 = vpop.f32.mrb[0].mxu0
  %v4236 = vpop.f32.mrb[0].mxu0
  %v4237 = vadd.f32 %v618, %v4236
  %v4238 = vpop.f32.mrb[0].mxu0
  %4239 = vmatprep.mubr.bf16.mxu0 0
  %4240 = vmatmul.mubr.bf16.gmra.mrb[0].mxu0 %v2547
  %v4241 = vpop.f32.mrb[0].mxu0
  %v4242 = vadd.f32 %v618, %v4241
  %v4243 = vpop.f32.mrb[0].mxu0
  %v4244 = vpop.f32.mrb[0].mxu0
  %v4245 = vadd.f32 %v618, %v4244
  %v4246 = vpop.f32.mrb[0].mxu0
  %4247 = vmatprep.mubr.bf16.mxu0 0
  %4248 = vmatmul.mubr.bf16.gmra.mrb[0].mxu0 %v2550
  %v4249 = vpop.f32.mrb[0].mxu0
  %v4250 = vadd.f32 %v618, %v4249
  %v4251 = vpop.f32.mrb[0].mxu0
  %v4252 = vpop.f32.mrb[0].mxu0
  %v4253 = vadd.f32 %v618, %v4252
  %v4254 = vpop.f32.mrb[0].mxu0
  %4255 = vmatprep.mubr.bf16.mxu0 0
  %4256 = vmatmul.mubr.bf16.gmra.mrb[0].mxu0 %v2553
  %v4257 = vpop.f32.mrb[0].mxu0
  %v4258 = vadd.f32 %v618, %v4257
  %v4259 = vpop.f32.mrb[0].mxu0
  %v4260 = vpop.f32.mrb[0].mxu0
  %v4261 = vadd.f32 %v618, %v4260
  %v4262 = vpop.f32.mrb[0].mxu0
  %4263 = vmatprep.mubr.bf16.mxu0 0
  %4264 = vmatmul.mubr.bf16.gmra.mrb[0].mxu0 %v2556
  %v4265 = vpop.f32.mrb[0].mxu0
  %v4266 = vadd.f32 %v618, %v4265
  %v4267 = vpop.f32.mrb[0].mxu0
  %v4268 = vpop.f32.mrb[0].mxu0
  %v4269 = vadd.f32 %v618, %v4268
  %v4270 = vpop.f32.mrb[0].mxu0
  %4271 = vmatprep.mubr.bf16.mxu0 0
  %4272 = vmatmul.mubr.bf16.gmra.mrb[0].mxu0 %v2559
  %v4273 = vpop.f32.mrb[0].mxu0
  %v4274 = vadd.f32 %v618, %v4273
  %v4275 = vpop.f32.mrb[0].mxu0
  %v4276 = vpop.f32.mrb[0].mxu0
  %v4277 = vadd.f32 %v618, %v4276
  %v4278 = vpop.f32.mrb[0].mxu0
  %4279 = vmatprep.mubr.bf16.mxu0 0
  %4280 = vmatmul.mubr.bf16.gmra.mrb[0].mxu0 %v2562
  %v4281 = vpop.f32.mrb[0].mxu0
  %v4282 = vadd.f32 %v618, %v4281
  %v4283 = vpop.f32.mrb[0].mxu0
  %v4284 = vpop.f32.mrb[0].mxu0
  %v4285 = vadd.f32 %v618, %v4284
  %v4286 = vpop.f32.mrb[0].mxu0
  %4287 = vmatprep.mubr.bf16.mxu0 0
  %4288 = vmatmul.mubr.bf16.gmra.mrb[0].mxu0 %v2565
  %v4289 = vpop.f32.mrb[0].mxu0
  %v4290 = vadd.f32 %v618, %v4289
  %v4291 = vpop.f32.mrb[0].mxu0
  %v4292 = vpop.f32.mrb[0].mxu0
  %v4293 = vadd.f32 %v618, %v4292
  %v4294 = vpop.f32.mrb[0].mxu0
  %4295 = vmatprep.mubr.bf16.mxu0 0
  %4296 = vmatmul.mubr.bf16.gmra.mrb[0].mxu0 %v2568
  %v4297 = vpop.f32.mrb[0].mxu0
  %v4298 = vadd.f32 %v618, %v4297
  %v4299 = vpop.f32.mrb[0].mxu0
  %v4300 = vpop.f32.mrb[0].mxu0
  %v4301 = vadd.f32 %v618, %v4300
  %v4302 = vpop.f32.mrb[0].mxu0
  %4303 = vmatprep.mubr.bf16.mxu0 0
  %4304 = vmatmul.mubr.bf16.gmra.mrb[0].mxu0 %v2571
  %v4305 = vpop.f32.mrb[0].mxu0
  %v4306 = vadd.f32 %v618, %v4305
  %v4307 = vpop.f32.mrb[0].mxu0
  %v4308 = vpop.f32.mrb[0].mxu0
  %v4309 = vadd.f32 %v618, %v4308
  %v4310 = vpop.f32.mrb[0].mxu0
  %4311 = vmatprep.mubr.bf16.mxu0 0
  %4312 = vmatmul.mubr.bf16.gmra.mrb[0].mxu0 %v2574
  %v4313 = vpop.f32.mrb[0].mxu0
  %v4314 = vadd.f32 %v618, %v4313
  %v4315 = vpop.f32.mrb[0].mxu0
  %v4316 = vpop.f32.mrb[0].mxu0
  %v4317 = vadd.f32 %v618, %v4316
  %v4318 = vpop.f32.mrb[0].mxu0
  %4319 = vmatprep.mubr.bf16.mxu0 0
  %4320 = vmatmul.mubr.bf16.gmra.mrb[0].mxu0 %v2577
  %v4321 = vpop.f32.mrb[0].mxu0
  %v4322 = vadd.f32 %v618, %v4321
  %v4323 = vpop.f32.mrb[0].mxu0
  %v4324 = vpop.f32.mrb[0].mxu0
  %v4325 = vadd.f32 %v618, %v4324
  %v4326 = vpop.f32.mrb[0].mxu0
  %4327 = vmatprep.mubr.bf16.mxu0 0
  %4328 = vmatmul.mubr.bf16.gmra.mrb[0].mxu0 %v2580
  %v4329 = vpop.f32.mrb[0].mxu0
  %v4330 = vadd.f32 %v618, %v4329
  %v4331 = vpop.f32.mrb[0].mxu0
  %v4332 = vpop.f32.mrb[0].mxu0
  %v4333 = vadd.f32 %v618, %v4332
  %v4334 = vpop.f32.mrb[0].mxu0
  %4335 = vmatprep.mubr.bf16.mxu0 0
  %4336 = vmatmul.mubr.bf16.gmra.mrb[0].mxu0 %v2583
  %v4337 = vpop.f32.mrb[0].mxu0
  %v4338 = vadd.f32 %v618, %v4337
  %v4339 = vpop.f32.mrb[0].mxu0
  %v4340 = vpop.f32.mrb[0].mxu0
  %v4341 = vadd.f32 %v618, %v4340
  %v4342 = vpop.f32.mrb[0].mxu0
  %4343 = vmatprep.mubr.bf16.mxu0 0
  %4344 = vmatmul.mubr.bf16.gmra.mrb[0].mxu0 %v2586
  %v4345 = vpop.f32.mrb[0].mxu0
  %v4346 = vadd.f32 %v618, %v4345
  %v4347 = vpop.f32.mrb[0].mxu0
  %v4348 = vpop.f32.mrb[0].mxu0
  %v4349 = vadd.f32 %v618, %v4348
  %v4350 = vpop.f32.mrb[0].mxu0
  %4351 = vmatprep.mubr.bf16.mxu0 0
  %4352 = vmatmul.mubr.bf16.gmra.mrb[0].mxu0 %v2589
  %v4353 = vpop.f32.mrb[0].mxu0
  %v4354 = vadd.f32 %v618, %v4353
  %v4355 = vpop.f32.mrb[0].mxu0
  %v4356 = vpop.f32.mrb[0].mxu0
  %v4357 = vadd.f32 %v618, %v4356
  %v4358 = vpop.f32.mrb[0].mxu0
  %4359 = vmatprep.mubr.bf16.mxu0 0
  %4360 = vmatmul.mubr.bf16.gmra.mrb[0].mxu0 %v2592
  %v4361 = vpop.f32.mrb[0].mxu0
  %v4362 = vadd.f32 %v618, %v4361
  %v4363 = vpop.f32.mrb[0].mxu0
  %v4364 = vpop.f32.mrb[0].mxu0
  %v4365 = vadd.f32 %v618, %v4364
  %v4366 = vpop.f32.mrb[0].mxu0
  %4367 = vmatprep.mubr.bf16.mxu0 0
  %4368 = vmatmul.mubr.bf16.gmra.mrb[0].mxu0 %v2595
  %v4369 = vpop.f32.mrb[0].mxu0
  %v4370 = vadd.f32 %v618, %v4369
  %v4371 = vpop.f32.mrb[0].mxu0
  %v4372 = vpop.f32.mrb[0].mxu0
  %v4373 = vadd.f32 %v618, %v4372
  %v4374 = vpop.f32.mrb[0].mxu0
  %4375 = vmatprep.mubr.bf16.mxu0 0
  %4376 = vmatmul.mubr.bf16.gmra.mrb[0].mxu0 %v2598
  %v4377 = vpop.f32.mrb[0].mxu0
  %v4378 = vadd.f32 %v618, %v4377
  %v4379 = vpop.f32.mrb[0].mxu0
  %v4380 = vpop.f32.mrb[0].mxu0
  %v4381 = vadd.f32 %v618, %v4380
  %v4382 = vpop.f32.mrb[0].mxu0
  %4383 = vmatprep.mubr.bf16.mxu0 0
  %4384 = vmatmul.mubr.bf16.gmra.mrb[0].mxu0 %v2601
  %v4385 = vpop.f32.mrb[0].mxu0
  %v4386 = vadd.f32 %v618, %v4385
  %v4387 = vpop.f32.mrb[0].mxu0
  %v4388 = vpop.f32.mrb[0].mxu0
  %v4389 = vadd.f32 %v618, %v4388
  %v4390 = vpop.f32.mrb[0].mxu0
  %4391 = vmatprep.mubr.bf16.mxu0 0
  %4392 = vmatmul.mubr.bf16.gmra.mrb[0].mxu0 %v2604
  %v4393 = vpop.f32.mrb[0].mxu0
  %v4394 = vadd.f32 %v618, %v4393
  %v4395 = vpop.f32.mrb[0].mxu0
  %v4396 = vpop.f32.mrb[0].mxu0
  %v4397 = vadd.f32 %v618, %v4396
  %v4398 = vpop.f32.mrb[0].mxu0
  %4399 = vmatprep.mubr.bf16.mxu0 0
  %4400 = vmatmul.mubr.bf16.gmra.mrb[0].mxu0 %v2607
  %v4401 = vpop.f32.mrb[0].mxu0
  %v4402 = vadd.f32 %v618, %v4401
  %v4403 = vpop.f32.mrb[0].mxu0
  %v4404 = vpop.f32.mrb[0].mxu0
  %v4405 = vadd.f32 %v618, %v4404
  %v4406 = vpop.f32.mrb[0].mxu0
  %4407 = vmatprep.mubr.bf16.mxu0 0
  %4408 = vmatmul.mubr.bf16.gmra.mrb[0].mxu0 %v2610
  %v4409 = vpop.f32.mrb[0].mxu0
  %v4410 = vadd.f32 %v618, %v4409
  %v4411 = vpop.f32.mrb[0].mxu0
  %v4412 = vpop.f32.mrb[0].mxu0
  %v4413 = vadd.f32 %v618, %v4412
  %v4414 = vpop.f32.mrb[0].mxu0
  %4415 = vmatprep.mubr.bf16.mxu0 0
  %4416 = vmatmul.mubr.bf16.gmra.mrb[0].mxu0 %v2613
  %v4417 = vpop.f32.mrb[0].mxu0
  %v4418 = vadd.f32 %v618, %v4417
  %v4419 = vpop.f32.mrb[0].mxu0
  %v4420 = vpop.f32.mrb[0].mxu0
  %v4421 = vadd.f32 %v618, %v4420
  %v4422 = vpop.f32.mrb[0].mxu0
  %4423 = vmatprep.mubr.bf16.mxu0 0
  %4424 = vmatmul.mubr.bf16.gmra.mrb[0].mxu0 %v2616
  %v4425 = vpop.f32.mrb[0].mxu0
  %v4426 = vadd.f32 %v618, %v4425
  %v4427 = vpop.f32.mrb[0].mxu0
  %v4428 = vpop.f32.mrb[0].mxu0
  %v4429 = vadd.f32 %v618, %v4428
  %v4430 = vpop.f32.mrb[0].mxu0
  %4431 = vmatprep.mubr.bf16.mxu0 0
  %4432 = vmatmul.mubr.bf16.gmra.mrb[0].mxu0 %v2619
  %v4433 = vpop.f32.mrb[0].mxu0
  %v4434 = vadd.f32 %v618, %v4433
  %v4435 = vpop.f32.mrb[0].mxu0
  %v4436 = vpop.f32.mrb[0].mxu0
  %v4437 = vadd.f32 %v618, %v4436
  %v4438 = vpop.f32.mrb[0].mxu0
  %4439 = vmatprep.mubr.bf16.mxu0 0
  %4440 = vmatmul.mubr.bf16.gmra.mrb[0].mxu0 %v2622
  %v4441 = vpop.f32.mrb[0].mxu0
  %v4442 = vadd.f32 %v618, %v4441
  %v4443 = vpop.f32.mrb[0].mxu0
  %v4444 = vpop.f32.mrb[0].mxu0
  %v4445 = vadd.f32 %v618, %v4444
  %v4446 = vpop.f32.mrb[0].mxu0
  %4447 = vmatprep.mubr.bf16.mxu0 0
  %4448 = vmatmul.mubr.bf16.gmra.mrb[0].mxu0 %v2625
  %v4449 = vpop.f32.mrb[0].mxu0
  %v4450 = vadd.f32 %v618, %v4449
  %v4451 = vpop.f32.mrb[0].mxu0
  %v4452 = vpop.f32.mrb[0].mxu0
  %v4453 = vadd.f32 %v618, %v4452
  %v4454 = vpop.f32.mrb[0].mxu0
  %4455 = vmatprep.mubr.bf16.mxu0 0
  %4456 = vmatmul.mubr.bf16.gmra.mrb[0].mxu0 %v2628
  %v4457 = vpop.f32.mrb[0].mxu0
  %v4458 = vadd.f32 %v618, %v4457
  %v4459 = vpop.f32.mrb[0].mxu0
  %v4460 = vpop.f32.mrb[0].mxu0
  %v4461 = vadd.f32 %v618, %v4460
  %v4462 = vpop.f32.mrb[0].mxu0
  %4463 = vmatprep.mubr.bf16.mxu0 0
  %4464 = vmatmul.mubr.bf16.gmra.mrb[0].mxu0 %v2631
  %v4465 = vpop.f32.mrb[0].mxu0
  %v4466 = vadd.f32 %v618, %v4465
  %v4467 = vpop.f32.mrb[0].mxu0
  %v4468 = vpop.f32.mrb[0].mxu0
  %v4469 = vadd.f32 %v618, %v4468
  %v4470 = vpop.f32.mrb[0].mxu0
  %4471 = vmatprep.mubr.bf16.mxu0 0
  %4472 = vmatmul.mubr.bf16.gmra.mrb[0].mxu0 %v2634
  %v4473 = vpop.f32.mrb[0].mxu0
  %v4474 = vadd.f32 %v618, %v4473
  %v4475 = vpop.f32.mrb[0].mxu0
  %v4476 = vpop.f32.mrb[0].mxu0
  %v4477 = vadd.f32 %v618, %v4476
  %v4478 = vpop.f32.mrb[0].mxu0
  %4479 = vmatprep.mubr.bf16.mxu0 0
  %4480 = vmatmul.mubr.bf16.gmra.mrb[0].mxu0 %v2637
  %v4481 = vpop.f32.mrb[0].mxu0
  %v4482 = vadd.f32 %v618, %v4481
  %v4483 = vpop.f32.mrb[0].mxu0
  %v4484 = vpop.f32.mrb[0].mxu0
  %v4485 = vadd.f32 %v618, %v4484
  %v4486 = vpop.f32.mrb[0].mxu0
  %4487 = vmatprep.mubr.bf16.mxu0 0
  %4488 = vmatmul.mubr.bf16.gmra.mrb[0].mxu0 %v2640
  %v4489 = vpop.f32.mrb[0].mxu0
  %v4490 = vadd.f32 %v618, %v4489
  %v4491 = vpop.f32.mrb[0].mxu0
  %v4492 = vpop.f32.mrb[0].mxu0
  %v4493 = vadd.f32 %v618, %v4492
  %v4494 = vpop.f32.mrb[0].mxu0
  %4495 = vmatprep.mubr.bf16.mxu0 0
  %4496 = vmatmul.mubr.bf16.gmra.mrb[0].mxu0 %v2643
  %v4497 = vpop.f32.mrb[0].mxu0
  %v4498 = vadd.f32 %v618, %v4497
  %v4499 = vpop.f32.mrb[0].mxu0
  %v4500 = vpop.f32.mrb[0].mxu0
  %v4501 = vadd.f32 %v618, %v4500
  %v4502 = vpop.f32.mrb[0].mxu0
  %4503 = vmatprep.mubr.bf16.mxu0 0
  %4504 = vmatmul.mubr.bf16.gmra.mrb[0].mxu0 %v2646
  %v4505 = vpop.f32.mrb[0].mxu0
  %v4506 = vadd.f32 %v618, %v4505
  %v4507 = vpop.f32.mrb[0].mxu0
  %v4508 = vpop.f32.mrb[0].mxu0
  %v4509 = vadd.f32 %v618, %v4508
  %v4510 = vpop.f32.mrb[0].mxu0
  %4511 = vmatprep.mubr.bf16.mxu0 0
  %4512 = vmatmul.mubr.bf16.gmra.mrb[0].mxu0 %v2649
  %v4513 = vpop.f32.mrb[0].mxu0
  %v4514 = vadd.f32 %v618, %v4513
  %v4515 = vpop.f32.mrb[0].mxu0
  %v4516 = vpop.f32.mrb[0].mxu0
  %v4517 = vadd.f32 %v618, %v4516
  %v4518 = vpop.f32.mrb[0].mxu0
  %4519 = vmatprep.mubr.bf16.mxu0 0
  %4520 = vmatmul.mubr.bf16.gmra.mrb[0].mxu0 %v2652
  %v4521 = vpop.f32.mrb[0].mxu0
  %v4522 = vadd.f32 %v618, %v4521
  %v4523 = vpop.f32.mrb[0].mxu0
  %v4524 = vpop.f32.mrb[0].mxu0
  %v4525 = vadd.f32 %v618, %v4524
  %v4526 = vpop.f32.mrb[0].mxu0
  %4527 = vmatprep.mubr.bf16.mxu0 0
  %4528 = vmatmul.mubr.bf16.gmra.mrb[0].mxu0 %v2655
  %v4529 = vpop.f32.mrb[0].mxu0
  %v4530 = vadd.f32 %v618, %v4529
  %v4531 = vpop.f32.mrb[0].mxu0
  %v4532 = vpop.f32.mrb[0].mxu0
  %v4533 = vadd.f32 %v618, %v4532
  %v4534 = vpop.f32.mrb[0].mxu0
  %4535 = vmatprep.mubr.bf16.mxu0 0
  %4536 = vmatmul.mubr.bf16.gmra.mrb[0].mxu0 %v2658
  %v4537 = vpop.f32.mrb[0].mxu0
  %v4538 = vadd.f32 %v618, %v4537
  %v4539 = vpop.f32.mrb[0].mxu0
  %v4540 = vpop.f32.mrb[0].mxu0
  %v4541 = vadd.f32 %v618, %v4540
  %v4542 = vpop.f32.mrb[0].mxu0
  %4543 = vmatprep.mubr.bf16.mxu0 0
  %4544 = vmatmul.mubr.bf16.gmra.mrb[0].mxu0 %v2661
  %v4545 = vpop.f32.mrb[0].mxu0
  %v4546 = vadd.f32 %v618, %v4545
  %v4547 = vpop.f32.mrb[0].mxu0
  %v4548 = vpop.f32.mrb[0].mxu0
  %v4549 = vadd.f32 %v618, %v4548
  %v4550 = vpop.f32.mrb[0].mxu0
  %4551 = vmatprep.mubr.bf16.mxu0 0
  %4552 = vmatmul.mubr.bf16.gmra.mrb[0].mxu0 %v2664
  %v4553 = vpop.f32.mrb[0].mxu0
  %v4554 = vadd.f32 %v618, %v4553
  %v4555 = vpop.f32.mrb[0].mxu0
  %v4556 = vpop.f32.mrb[0].mxu0
  %v4557 = vadd.f32 %v618, %v4556
  %v4558 = vpop.f32.mrb[0].mxu0
  %4559 = vmatprep.mubr.bf16.mxu0 0
  %4560 = vmatmul.mubr.bf16.gmra.mrb[0].mxu0 %v2667
  %v4561 = vpop.f32.mrb[0].mxu0
  %v4562 = vadd.f32 %v618, %v4561
  %v4563 = vpop.f32.mrb[0].mxu0
  %v4564 = vpop.f32.mrb[0].mxu0
  %v4565 = vadd.f32 %v618, %v4564
  %v4566 = vpop.f32.mrb[0].mxu0
  %4567 = vmatprep.mubr.bf16.mxu0 0
  %4568 = vmatmul.mubr.bf16.gmra.mrb[0].mxu0 %v2670
  %v4569 = vpop.f32.mrb[0].mxu0
  %v4570 = vadd.f32 %v618, %v4569
  %v4571 = vpop.f32.mrb[0].mxu0
  %v4572 = vpop.f32.mrb[0].mxu0
  %v4573 = vadd.f32 %v618, %v4572
  %v4574 = vpop.f32.mrb[0].mxu0
  %4575 = vmatprep.mubr.bf16.mxu0 0
  %4576 = vmatmul.mubr.bf16.gmra.mrb[0].mxu0 %v2673
  %v4577 = vpop.f32.mrb[0].mxu0
  %v4578 = vadd.f32 %v618, %v4577
  %v4579 = vpop.f32.mrb[0].mxu0
  %v4580 = vpop.f32.mrb[0].mxu0
  %v4581 = vadd.f32 %v618, %v4580
  %v4582 = vpop.f32.mrb[0].mxu0
  %4583 = vmatprep.mubr.bf16.mxu0 0
  %4584 = vmatmul.mubr.bf16.gmra.mrb[0].mxu0 %v2676
  %v4585 = vpop.f32.mrb[0].mxu0
  %v4586 = vadd.f32 %v618, %v4585
  %v4587 = vpop.f32.mrb[0].mxu0
  %v4588 = vpop.f32.mrb[0].mxu0
  %v4589 = vadd.f32 %v618, %v4588
  %v4590 = vpop.f32.mrb[0].mxu0
  %4591 = vmatprep.mubr.bf16.mxu0 0
  %4592 = vmatmul.mubr.bf16.gmra.mrb[0].mxu0 %v2679
  %v4593 = vpop.f32.mrb[0].mxu0
  %v4594 = vadd.f32 %v618, %v4593
  %v4595 = vpop.f32.mrb[0].mxu0
  %v4596 = vpop.f32.mrb[0].mxu0
  %v4597 = vadd.f32 %v618, %v4596
  %v4598 = vpop.f32.mrb[0].mxu0
  %4599 = vmatprep.mubr.bf16.mxu0 0
  %4600 = vmatmul.mubr.bf16.gmra.mrb[0].mxu0 %v2682
  %v4601 = vpop.f32.mrb[0].mxu0
  %v4602 = vadd.f32 %v618, %v4601
  %v4603 = vpop.f32.mrb[0].mxu0
  %v4604 = vpop.f32.mrb[0].mxu0
  %v4605 = vadd.f32 %v618, %v4604
  %v4606 = vpop.f32.mrb[0].mxu0
  %4607 = vmatprep.mubr.bf16.mxu0 0
  %4608 = vmatmul.mubr.bf16.gmra.mrb[0].mxu0 %v2685
  %v4609 = vpop.f32.mrb[0].mxu0
  %v4610 = vadd.f32 %v618, %v4609
  %v4611 = vpop.f32.mrb[0].mxu0
  %v4612 = vpop.f32.mrb[0].mxu0
  %v4613 = vadd.f32 %v618, %v4612
  %v4614 = vpop.f32.mrb[0].mxu0
  %4615 = vmatprep.mubr.bf16.mxu0 0
  %4616 = vmatmul.mubr.bf16.gmra.mrb[0].mxu0 %v2688
  %v4617 = vpop.f32.mrb[0].mxu0
  %v4618 = vadd.f32 %v618, %v4617
  %v4619 = vpop.f32.mrb[0].mxu0
  %v4620 = vpop.f32.mrb[0].mxu0
  %v4621 = vadd.f32 %v618, %v4620
  %v4622 = vpop.f32.mrb[0].mxu0
  %4623 = vmatprep.mubr.bf16.mxu0 0
  %4624 = vmatmul.mubr.bf16.gmra.mrb[0].mxu0 %v2691
  %v4625 = vpop.f32.mrb[0].mxu0
  %v4626 = vadd.f32 %v618, %v4625
  %v4627 = vpop.f32.mrb[0].mxu0
  %v4628 = vpop.f32.mrb[0].mxu0
  %v4629 = vadd.f32 %v618, %v4628
  %v4630 = vpop.f32.mrb[0].mxu0
  %4631 = vmatprep.mubr.bf16.mxu0 0
  %4632 = vmatmul.mubr.bf16.gmra.mrb[0].mxu0 %v2694
  %v4633 = vpop.f32.mrb[0].mxu0
  %v4634 = vadd.f32 %v618, %v4633
  %v4635 = vpop.f32.mrb[0].mxu0
  %v4636 = vpop.f32.mrb[0].mxu0
  %v4637 = vadd.f32 %v618, %v4636
  %v4638 = vpop.f32.mrb[0].mxu0
  %4639 = vmatprep.mubr.bf16.mxu0 0
  %4640 = vmatmul.mubr.bf16.gmra.mrb[0].mxu0 %v2697
  %v4641 = vpop.f32.mrb[0].mxu0
  %v4642 = vadd.f32 %v618, %v4641
  %v4643 = vpop.f32.mrb[0].mxu0
  %v4644 = vpop.f32.mrb[0].mxu0
  %v4645 = vadd.f32 %v618, %v4644
  %v4646 = vpop.f32.mrb[0].mxu0
  %4647 = vmatprep.mubr.bf16.mxu0 0
  %4648 = vmatmul.mubr.bf16.gmra.mrb[0].mxu0 %v2700
  %v4649 = vpop.f32.mrb[0].mxu0
  %v4650 = vadd.f32 %v618, %v4649
  %v4651 = vpop.f32.mrb[0].mxu0
  %v4652 = vpop.f32.mrb[0].mxu0
  %v4653 = vadd.f32 %v618, %v4652
  %v4654 = vpop.f32.mrb[0].mxu0
  %4655 = vmatprep.mubr.bf16.mxu0 0
  %4656 = vmatmul.mubr.bf16.gmra.mrb[0].mxu0 %v2703
  %v4657 = vpop.f32.mrb[0].mxu0
  %v4658 = vadd.f32 %v618, %v4657
  %v4659 = vpop.f32.mrb[0].mxu0
  %v4660 = vpop.f32.mrb[0].mxu0
  %v4661 = vadd.f32 %v618, %v4660
  %v4662 = vpop.f32.mrb[0].mxu0
  %4663 = vmatprep.mubr.bf16.mxu0 0
  %4664 = vmatmul.mubr.bf16.gmra.mrb[0].mxu0 %v2706
  %v4665 = vpop.f32.mrb[0].mxu0
  %v4666 = vadd.f32 %v618, %v4665
  %v4667 = vpop.f32.mrb[0].mxu0
  %v4668 = vpop.f32.mrb[0].mxu0
  %v4669 = vadd.f32 %v618, %v4668
  %v4670 = vpop.f32.mrb[0].mxu0
  %4671 = vmatprep.mubr.bf16.mxu0 0
  %4672 = vmatmul.mubr.bf16.gmra.mrb[0].mxu0 %v2709
  %v4673 = vpop.f32.mrb[0].mxu0
  %v4674 = vadd.f32 %v618, %v4673
  %v4675 = vpop.f32.mrb[0].mxu0
  %v4676 = vpop.f32.mrb[0].mxu0
  %v4677 = vadd.f32 %v618, %v4676
  %v4678 = vpop.f32.mrb[0].mxu0
  %4679 = vmatprep.mubr.bf16.mxu0 0
  %4680 = vmatmul.mubr.bf16.gmra.mrb[0].mxu0 %v2712
  %v4681 = vpop.f32.mrb[0].mxu0
  %v4682 = vadd.f32 %v618, %v4681
  %v4683 = vpop.f32.mrb[0].mxu0
  %v4684 = vpop.f32.mrb[0].mxu0
  %v4685 = vadd.f32 %v618, %v4684
  %v4686 = vpop.f32.mrb[0].mxu0
  %4687 = vmatprep.mubr.bf16.mxu0 0
  %4688 = vmatmul.mubr.bf16.gmra.mrb[0].mxu0 %v2715
  %v4689 = vpop.f32.mrb[0].mxu0
  %v4690 = vadd.f32 %v618, %v4689
  %v4691 = vpop.f32.mrb[0].mxu0
  %v4692 = vpop.f32.mrb[0].mxu0
  %v4693 = vadd.f32 %v618, %v4692
  %v4694 = vpop.f32.mrb[0].mxu0
  %4695 = vmatprep.mubr.bf16.mxu0 0
  %4696 = vmatmul.mubr.bf16.gmra.mrb[0].mxu0 %v2718
  %v4697 = vpop.f32.mrb[0].mxu0
  %v4698 = vadd.f32 %v618, %v4697
  %v4699 = vpop.f32.mrb[0].mxu0
  %v4700 = vpop.f32.mrb[0].mxu0
  %v4701 = vadd.f32 %v618, %v4700
  %v4702 = vpop.f32.mrb[0].mxu0
  %4703 = vmatprep.mubr.bf16.mxu0 0
  %4704 = vmatmul.mubr.bf16.gmra.mrb[0].mxu0 %v2721
  %v4705 = vpop.f32.mrb[0].mxu0
  %v4706 = vadd.f32 %v618, %v4705
  %v4707 = vpop.f32.mrb[0].mxu0
  %v4708 = vpop.f32.mrb[0].mxu0
  %v4709 = vadd.f32 %v618, %v4708
  %v4710 = vpop.f32.mrb[0].mxu0
  %4711 = vmatprep.mubr.bf16.mxu0 0
  %4712 = vmatmul.mubr.bf16.gmra.mrb[0].mxu0 %v2724
  %v4713 = vpop.f32.mrb[0].mxu0
  %v4714 = vadd.f32 %v618, %v4713
  %v4715 = vpop.f32.mrb[0].mxu0
  %v4716 = vpop.f32.mrb[0].mxu0
  %v4717 = vadd.f32 %v618, %v4716
  %v4718 = vpop.f32.mrb[0].mxu0
  %4719 = vmatprep.mubr.bf16.mxu0 0
  %4720 = vmatmul.mubr.bf16.gmra.mrb[0].mxu0 %v2727
  %v4721 = vpop.f32.mrb[0].mxu0
  %v4722 = vadd.f32 %v618, %v4721
  %v4723 = vpop.f32.mrb[0].mxu0
  %v4724 = vpop.f32.mrb[0].mxu0
  %v4725 = vadd.f32 %v618, %v4724
  %v4726 = vpop.f32.mrb[0].mxu0
  %4727 = vmatprep.mubr.bf16.mxu0 0
  %4728 = vmatmul.mubr.bf16.gmra.mrb[0].mxu0 %v2730
  %v4729 = vpop.f32.mrb[0].mxu0
  %v4730 = vadd.f32 %v618, %v4729
  %v4731 = vpop.f32.mrb[0].mxu0
  %v4732 = vpop.f32.mrb[0].mxu0
  %v4733 = vadd.f32 %v618, %v4732
  %v4734 = vpop.f32.mrb[0].mxu0
  %4735 = vmatprep.mubr.bf16.mxu0 0
  %4736 = vmatmul.mubr.bf16.gmra.mrb[0].mxu0 %v2733
  %v4737 = vpop.f32.mrb[0].mxu0
  %v4738 = vadd.f32 %v618, %v4737
  %v4739 = vpop.f32.mrb[0].mxu0
  %v4740 = vpop.f32.mrb[0].mxu0
  %v4741 = vadd.f32 %v618, %v4740
  %v4742 = vpop.f32.mrb[0].mxu0
  %4743 = vmatprep.mubr.bf16.mxu0 0
  %4744 = vmatmul.mubr.bf16.gmra.mrb[0].mxu0 %v2736
  %v4745 = vpop.f32.mrb[0].mxu0
  %v4746 = vadd.f32 %v618, %v4745
  %v4747 = vpop.f32.mrb[0].mxu0
  %v4748 = vpop.f32.mrb[0].mxu0
  %v4749 = vadd.f32 %v618, %v4748
  %v4750 = vpop.f32.mrb[0].mxu0
  %4751 = vmatprep.mubr.bf16.mxu0 0
  %4752 = vmatmul.mubr.bf16.gmra.mrb[0].mxu0 %v2739
  %v4753 = vpop.f32.mrb[0].mxu0
  %v4754 = vadd.f32 %v618, %v4753
  %v4755 = vpop.f32.mrb[0].mxu0
  %v4756 = vpop.f32.mrb[0].mxu0
  %v4757 = vadd.f32 %v618, %v4756
  %v4758 = vpop.f32.mrb[0].mxu0
  %4759 = vmatprep.mubr.bf16.mxu0 0
  %4760 = vmatmul.mubr.bf16.gmra.mrb[0].mxu0 %v2742
  %v4761 = vpop.f32.mrb[0].mxu0
  %v4762 = vadd.f32 %v618, %v4761
  %v4763 = vpop.f32.mrb[0].mxu0
  %v4764 = vpop.f32.mrb[0].mxu0
  %v4765 = vadd.f32 %v618, %v4764
  %v4766 = vpop.f32.mrb[0].mxu0
  %4767 = vmatprep.mubr.bf16.mxu0 0
  %4768 = vmatmul.mubr.bf16.gmra.mrb[0].mxu0 %v2745
  %v4769 = vpop.f32.mrb[0].mxu0
  %v4770 = vadd.f32 %v618, %v4769
  %v4771 = vpop.f32.mrb[0].mxu0
  %v4772 = vpop.f32.mrb[0].mxu0
  %v4773 = vadd.f32 %v618, %v4772
  %v4774 = vpop.f32.mrb[0].mxu0
  %4775 = vmatprep.mubr.bf16.mxu0 0
  %4776 = vmatmul.mubr.bf16.gmra.mrb[0].mxu0 %v2748
  %v4777 = vpop.f32.mrb[0].mxu0
  %v4778 = vadd.f32 %v618, %v4777
  %v4779 = vpop.f32.mrb[0].mxu0
  %v4780 = vpop.f32.mrb[0].mxu0
  %v4781 = vadd.f32 %v618, %v4780
  %v4782 = vpop.f32.mrb[0].mxu0
  %4783 = vmatprep.mubr.bf16.mxu0 0
  %4784 = vmatmul.mubr.bf16.gmra.mrb[0].mxu0 %v2751
  %v4785 = vpop.f32.mrb[0].mxu0
  %v4786 = vadd.f32 %v618, %v4785
  %v4787 = vpop.f32.mrb[0].mxu0
  %v4788 = vpop.f32.mrb[0].mxu0
  %v4789 = vadd.f32 %v618, %v4788
  %v4790 = vpop.f32.mrb[0].mxu0
  %4791 = vmatprep.mubr.bf16.mxu0 0
  %4792 = vmatmul.mubr.bf16.gmra.mrb[0].mxu0 %v2754
  %v4793 = vpop.f32.mrb[0].mxu0
  %v4794 = vadd.f32 %v618, %v4793
  %v4795 = vpop.f32.mrb[0].mxu0
  %v4796 = vpop.f32.mrb[0].mxu0
  %v4797 = vadd.f32 %v618, %v4796
  %v4798 = vpop.f32.mrb[0].mxu0
  %4799 = vmatprep.mubr.bf16.mxu0 0
  %4800 = vmatmul.mubr.bf16.gmra.mrb[0].mxu0 %v2757
  %v4801 = vpop.f32.mrb[0].mxu0
  %v4802 = vadd.f32 %v618, %v4801
  %v4803 = vpop.f32.mrb[0].mxu0
  %v4804 = vpop.f32.mrb[0].mxu0
  %v4805 = vadd.f32 %v618, %v4804
  %v4806 = vpop.f32.mrb[0].mxu0
  %4807 = vmatprep.mubr.bf16.mxu0 0
  %4808 = vmatmul.mubr.bf16.gmra.mrb[0].mxu0 %v2760
  %v4809 = vpop.f32.mrb[0].mxu0
  %v4810 = vadd.f32 %v618, %v4809
  %v4811 = vpop.f32.mrb[0].mxu0
  %v4812 = vpop.f32.mrb[0].mxu0
  %v4813 = vadd.f32 %v618, %v4812
  %v4814 = vpop.f32.mrb[0].mxu0
  %4815 = vmatprep.mubr.bf16.mxu0 0
  %4816 = vmatmul.mubr.bf16.gmra.mrb[0].mxu0 %v2763
  %v4817 = vpop.f32.mrb[0].mxu0
  %v4818 = vadd.f32 %v618, %v4817
  %v4819 = vpop.f32.mrb[0].mxu0
  %v4820 = vpop.f32.mrb[0].mxu0
  %v4821 = vadd.f32 %v618, %v4820
  %v4822 = vpop.f32.mrb[0].mxu0
  %4823 = vmatprep.mubr.bf16.mxu0 0
  %4824 = vmatmul.mubr.bf16.gmra.mrb[0].mxu0 %v2766
  %v4825 = vpop.f32.mrb[0].mxu0
  %v4826 = vadd.f32 %v618, %v4825
  %v4827 = vpop.f32.mrb[0].mxu0
  %v4828 = vpop.f32.mrb[0].mxu0
  %v4829 = vadd.f32 %v618, %v4828
  %v4830 = vpop.f32.mrb[0].mxu0
  %4831 = vmatprep.mubr.bf16.mxu0 0
  %4832 = vmatmul.mubr.bf16.gmra.mrb[0].mxu0 %v2769
  %v4833 = vpop.f32.mrb[0].mxu0
  %v4834 = vadd.f32 %v618, %v4833
  %v4835 = vpop.f32.mrb[0].mxu0
  %v4836 = vpop.f32.mrb[0].mxu0
  %v4837 = vadd.f32 %v618, %v4836
  %v4838 = vpop.f32.mrb[0].mxu0
  %4839 = vmatprep.mubr.bf16.mxu0 0
  %4840 = vmatmul.mubr.bf16.gmra.mrb[0].mxu0 %v2772
  %v4841 = vpop.f32.mrb[0].mxu0
  %v4842 = vadd.f32 %v618, %v4841
  %v4843 = vpop.f32.mrb[0].mxu0
  %v4844 = vpop.f32.mrb[0].mxu0
  %v4845 = vadd.f32 %v618, %v4844
  %v4846 = vpop.f32.mrb[0].mxu0
  %4847 = vmatprep.mubr.bf16.mxu0 0
  %4848 = vmatmul.mubr.bf16.gmra.mrb[0].mxu0 %v2775
  %v4849 = vpop.f32.mrb[0].mxu0
  %v4850 = vadd.f32 %v618, %v4849
  %v4851 = vpop.f32.mrb[0].mxu0
  %v4852 = vpop.f32.mrb[0].mxu0
  %v4853 = vadd.f32 %v618, %v4852
  %v4854 = vpop.f32.mrb[0].mxu0
  %4855 = vmatprep.mubr.bf16.mxu0 0
  %4856 = vmatmul.mubr.bf16.gmra.mrb[0].mxu0 %v2778
  %v4857 = vpop.f32.mrb[0].mxu0
  %v4858 = vadd.f32 %v618, %v4857
  %v4859 = vpop.f32.mrb[0].mxu0
  %v4860 = vpop.f32.mrb[0].mxu0
  %v4861 = vadd.f32 %v618, %v4860
  %v4862 = vpop.f32.mrb[0].mxu0
  %4863 = vmatprep.mubr.bf16.mxu0 0
  %4864 = vmatmul.mubr.bf16.gmra.mrb[0].mxu0 %v2781
  %v4865 = vpop.f32.mrb[0].mxu0
  %v4866 = vadd.f32 %v618, %v4865
  %v4867 = vpop.f32.mrb[0].mxu0
  %v4868 = vpop.f32.mrb[0].mxu0
  %v4869 = vadd.f32 %v618, %v4868
  %v4870 = vpop.f32.mrb[0].mxu0
  %4871 = vmatprep.mubr.bf16.mxu0 0
  %4872 = vmatmul.mubr.bf16.gmra.mrb[0].mxu0 %v2784
  %v4873 = vpop.f32.mrb[0].mxu0
  %v4874 = vadd.f32 %v618, %v4873
  %v4875 = vpop.f32.mrb[0].mxu0
  %v4876 = vpop.f32.mrb[0].mxu0
  %v4877 = vadd.f32 %v618, %v4876
  %v4878 = vpop.f32.mrb[0].mxu0
  %4879 = vmatprep.mubr.bf16.mxu0 0
  %4880 = vmatmul.mubr.bf16.gmra.mrb[0].mxu0 %v2787
  %v4881 = vpop.f32.mrb[0].mxu0
  %v4882 = vadd.f32 %v618, %v4881
  %v4883 = vpop.f32.mrb[0].mxu0
  %v4884 = vpop.f32.mrb[0].mxu0
  %v4885 = vadd.f32 %v618, %v4884
  %v4886 = vpop.f32.mrb[0].mxu0
  %4887 = vmatprep.mubr.bf16.mxu0 0
  %4888 = vmatmul.mubr.bf16.gmra.mrb[0].mxu0 %v2790
  %v4889 = vpop.f32.mrb[0].mxu0
  %v4890 = vadd.f32 %v618, %v4889
  %v4891 = vpop.f32.mrb[0].mxu0
  %v4892 = vpop.f32.mrb[0].mxu0
  %v4893 = vadd.f32 %v618, %v4892
  %v4894 = vpop.f32.mrb[0].mxu0
  %4895 = vmatprep.mubr.bf16.mxu0 0
  %4896 = vmatmul.mubr.bf16.gmra.mrb[0].mxu0 %v2793
  %v4897 = vpop.f32.mrb[0].mxu0
  %v4898 = vadd.f32 %v618, %v4897
  %v4899 = vpop.f32.mrb[0].mxu0
  %v4900 = vpop.f32.mrb[0].mxu0
  %v4901 = vadd.f32 %v618, %v4900
  %v4902 = vpop.f32.mrb[0].mxu0
  %4903 = vmatprep.mubr.bf16.mxu0 0
  %4904 = vmatmul.mubr.bf16.gmra.mrb[0].mxu0 %v2796
  %v4905 = vpop.f32.mrb[0].mxu0
  %v4906 = vadd.f32 %v618, %v4905
  %v4907 = vpop.f32.mrb[0].mxu0
  %v4908 = vpop.f32.mrb[0].mxu0
  %v4909 = vadd.f32 %v618, %v4908
  %v4910 = vpop.f32.mrb[0].mxu0
  %4911 = vmatprep.mubr.bf16.mxu0 0
  %4912 = vmatmul.mubr.bf16.gmra.mrb[0].mxu0 %v2799
  %v4913 = vpop.f32.mrb[0].mxu0
  %v4914 = vadd.f32 %v618, %v4913
  %v4915 = vpop.f32.mrb[0].mxu0
  %v4916 = vpop.f32.mrb[0].mxu0
  %v4917 = vadd.f32 %v618, %v4916
  %v4918 = vpop.f32.mrb[0].mxu0
  %4919 = vmatprep.mubr.bf16.mxu0 0
  %4920 = vmatmul.mubr.bf16.gmra.mrb[0].mxu0 %v2802
  %v4921 = vpop.f32.mrb[0].mxu0
  %v4922 = vadd.f32 %v618, %v4921
  %v4923 = vpop.f32.mrb[0].mxu0
  %v4924 = vpop.f32.mrb[0].mxu0
  %v4925 = vadd.f32 %v618, %v4924
  %v4926 = vpop.f32.mrb[0].mxu0
  %4927 = vmatprep.mubr.bf16.mxu0 0
  %4928 = vmatmul.mubr.bf16.gmra.mrb[0].mxu0 %v2805
  %v4929 = vpop.f32.mrb[0].mxu0
  %v4930 = vadd.f32 %v618, %v4929
  %v4931 = vpop.f32.mrb[0].mxu0
  %v4932 = vpop.f32.mrb[0].mxu0
  %v4933 = vadd.f32 %v618, %v4932
  %v4934 = vpop.f32.mrb[0].mxu0
  %4935 = vmatprep.mubr.bf16.mxu0 0
  %4936 = vmatmul.mubr.bf16.gmra.mrb[0].mxu0 %v2808
  %v4937 = vpop.f32.mrb[0].mxu0
  %v4938 = vadd.f32 %v618, %v4937
  %v4939 = vpop.f32.mrb[0].mxu0
  %v4940 = vpop.f32.mrb[0].mxu0
  %v4941 = vadd.f32 %v618, %v4940
  %v4942 = vpop.f32.mrb[0].mxu0
  %4943 = vmatprep.mubr.bf16.mxu0 0
  %4944 = vmatmul.mubr.bf16.gmra.mrb[0].mxu0 %v2811
  %v4945 = vpop.f32.mrb[0].mxu0
  %v4946 = vadd.f32 %v618, %v4945
  %v4947 = vpop.f32.mrb[0].mxu0
  %v4948 = vpop.f32.mrb[0].mxu0
  %v4949 = vadd.f32 %v618, %v4948
  %v4950 = vpop.f32.mrb[0].mxu0
  %4951 = vmatprep.mubr.bf16.mxu0 0
  %4952 = vmatmul.mubr.bf16.gmra.mrb[0].mxu0 %v2814
  %v4953 = vpop.f32.mrb[0].mxu0
  %v4954 = vadd.f32 %v618, %v4953
  %v4955 = vpop.f32.mrb[0].mxu0
  %v4956 = vpop.f32.mrb[0].mxu0
  %v4957 = vadd.f32 %v618, %v4956
  %v4958 = vpop.f32.mrb[0].mxu0
  %4959 = vmatprep.mubr.bf16.mxu0 0
  %4960 = vmatmul.mubr.bf16.gmra.mrb[0].mxu0 %v2817
  %v4961 = vpop.f32.mrb[0].mxu0
  %v4962 = vadd.f32 %v618, %v4961
  %v4963 = vpop.f32.mrb[0].mxu0
  %v4964 = vpop.f32.mrb[0].mxu0
  %v4965 = vadd.f32 %v618, %v4964
  %v4966 = vpop.f32.mrb[0].mxu0
  %4967 = vmatprep.mubr.bf16.mxu0 0
  %4968 = vmatmul.mubr.bf16.gmra.mrb[0].mxu0 %v2820
  %v4969 = vpop.f32.mrb[0].mxu0
  %v4970 = vadd.f32 %v618, %v4969
  %v4971 = vpop.f32.mrb[0].mxu0
  %v4972 = vpop.f32.mrb[0].mxu0
  %v4973 = vadd.f32 %v618, %v4972
  %v4974 = vpop.f32.mrb[0].mxu0
  %4975 = vmatprep.mubr.bf16.mxu0 0
  %4976 = vmatmul.mubr.bf16.gmra.mrb[0].mxu0 %v2823
  %v4977 = vpop.f32.mrb[0].mxu0
  %v4978 = vadd.f32 %v618, %v4977
  %v4979 = vpop.f32.mrb[0].mxu0
  %v4980 = vpop.f32.mrb[0].mxu0
  %v4981 = vadd.f32 %v618, %v4980
  %v4982 = vpop.f32.mrb[0].mxu0
  %4983 = vmatprep.mubr.bf16.mxu0 0
  %4984 = vmatmul.mubr.bf16.gmra.mrb[0].mxu0 %v2826
  %v4985 = vpop.f32.mrb[0].mxu0
  %v4986 = vadd.f32 %v618, %v4985
  %v4987 = vpop.f32.mrb[0].mxu0
  %v4988 = vpop.f32.mrb[0].mxu0
  %v4989 = vadd.f32 %v618, %v4988
  %v4990 = vpop.f32.mrb[0].mxu0
  %4991 = vmatprep.mubr.bf16.mxu0 0
  %4992 = vmatmul.mubr.bf16.gmra.mrb[0].mxu0 %v2829
  %v4993 = vpop.f32.mrb[0].mxu0
  %v4994 = vadd.f32 %v618, %v4993
  %v4995 = vpop.f32.mrb[0].mxu0
  %v4996 = vpop.f32.mrb[0].mxu0
  %v4997 = vadd.f32 %v618, %v4996
  %v4998 = vpop.f32.mrb[0].mxu0
  %4999 = vmatprep.mubr.bf16.mxu0 0
  %5000 = vmatmul.mubr.bf16.gmra.mrb[0].mxu0 %v2832
  %v5001 = vpop.f32.mrb[0].mxu0
  %v5002 = vadd.f32 %v618, %v5001
  %v5003 = vpop.f32.mrb[0].mxu0
  %v5004 = vpop.f32.mrb[0].mxu0
  %v5005 = vadd.f32 %v618, %v5004
  %v5006 = vpop.f32.mrb[0].mxu0
  %5007 = vmatprep.mubr.bf16.mxu0 0
  %5008 = vmatmul.mubr.bf16.gmra.mrb[0].mxu0 %v2835
  %v5009 = vpop.f32.mrb[0].mxu0
  %v5010 = vadd.f32 %v618, %v5009
  %v5011 = vpop.f32.mrb[0].mxu0
  %v5012 = vpop.f32.mrb[0].mxu0
  %v5013 = vadd.f32 %v618, %v5012
  %v5014 = vpop.f32.mrb[0].mxu0
  %5015 = vmatprep.mubr.bf16.mxu0 0
  %5016 = vmatmul.mubr.bf16.gmra.mrb[0].mxu0 %v2838
  %v5017 = vpop.f32.mrb[0].mxu0
  %v5018 = vadd.f32 %v618, %v5017
  %v5019 = vpop.f32.mrb[0].mxu0
  %v5020 = vpop.f32.mrb[0].mxu0
  %v5021 = vadd.f32 %v618, %v5020
  %v5022 = vpop.f32.mrb[0].mxu0
  %5023 = vmatprep.mubr.bf16.mxu0 0
  %5024 = vmatmul.mubr.bf16.gmra.mrb[0].mxu0 %v2841
  %v5025 = vpop.f32.mrb[0].mxu0
  %v5026 = vadd.f32 %v618, %v5025
  %v5027 = vpop.f32.mrb[0].mxu0
  %v5028 = vpop.f32.mrb[0].mxu0
  %v5029 = vadd.f32 %v618, %v5028
  %v5030 = vpop.f32.mrb[0].mxu0
  %5031 = vmatprep.mubr.bf16.mxu0 0
  %5032 = vmatmul.mubr.bf16.gmra.mrb[0].mxu0 %v2844
  %v5033 = vpop.f32.mrb[0].mxu0
  %v5034 = vadd.f32 %v618, %v5033
  %v5035 = vpop.f32.mrb[0].mxu0
  %v5036 = vpop.f32.mrb[0].mxu0
  %v5037 = vadd.f32 %v618, %v5036
  %v5038 = vpop.f32.mrb[0].mxu0
  %5039 = vmatprep.mubr.bf16.mxu0 0
  %5040 = vmatmul.mubr.bf16.gmra.mrb[0].mxu0 %v2847
  %v5041 = vpop.f32.mrb[0].mxu0
  %v5042 = vadd.f32 %v618, %v5041
  %v5043 = vpop.f32.mrb[0].mxu0
  %v5044 = vpop.f32.mrb[0].mxu0
  %v5045 = vadd.f32 %v618, %v5044
  %v5046 = vpop.f32.mrb[0].mxu0
  %5047 = vmatprep.mubr.bf16.mxu0 0
  %5048 = vmatmul.mubr.bf16.gmra.mrb[0].mxu0 %v2850
  %v5049 = vpop.f32.mrb[0].mxu0
  %v5050 = vadd.f32 %v618, %v5049
  %v5051 = vpop.f32.mrb[0].mxu0
  %v5052 = vpop.f32.mrb[0].mxu0
  %v5053 = vadd.f32 %v618, %v5052
  %v5054 = vpop.f32.mrb[0].mxu0
  %5055 = vmatprep.mubr.bf16.mxu0 0
  %5056 = vmatmul.mubr.bf16.gmra.mrb[0].mxu0 %v2853
  %v5057 = vpop.f32.mrb[0].mxu0
  %v5058 = vadd.f32 %v618, %v5057
  %v5059 = vpop.f32.mrb[0].mxu0
  %v5060 = vpop.f32.mrb[0].mxu0
  %v5061 = vadd.f32 %v618, %v5060
  %v5062 = vpop.f32.mrb[0].mxu0
  %5063 = vmatprep.mubr.bf16.mxu0 0
  %5064 = vmatmul.mubr.bf16.gmra.mrb[0].mxu0 %v2856
  %v5065 = vpop.f32.mrb[0].mxu0
  %v5066 = vadd.f32 %v618, %v5065
  %v5067 = vpop.f32.mrb[0].mxu0
  %v5068 = vpop.f32.mrb[0].mxu0
  %v5069 = vadd.f32 %v618, %v5068
  %v5070 = vpop.f32.mrb[0].mxu0
  %5071 = vmatprep.mubr.bf16.mxu0 0
  %5072 = vmatmul.mubr.bf16.gmra.mrb[0].mxu0 %v2859
  %v5073 = vpop.f32.mrb[0].mxu0
  %v5074 = vadd.f32 %v618, %v5073
  %v5075 = vpop.f32.mrb[0].mxu0
  %v5076 = vpop.f32.mrb[0].mxu0
  %v5077 = vadd.f32 %v618, %v5076
  %v5078 = vpop.f32.mrb[0].mxu0
  %5079 = vmatprep.mubr.bf16.mxu0 0
  %5080 = vmatmul.mubr.bf16.gmra.mrb[0].mxu0 %v2862
  %v5081 = vpop.f32.mrb[0].mxu0
  %v5082 = vadd.f32 %v618, %v5081
  %v5083 = vpop.f32.mrb[0].mxu0
  %v5084 = vpop.f32.mrb[0].mxu0
  %v5085 = vadd.f32 %v618, %v5084
  %v5086 = vpop.f32.mrb[0].mxu0
  %5087 = vmatprep.mubr.bf16.mxu0 0
  %5088 = vmatmul.mubr.bf16.gmra.mrb[0].mxu0 %v2865
  %v5089 = vpop.f32.mrb[0].mxu0
  %v5090 = vadd.f32 %v618, %v5089
  %v5091 = vpop.f32.mrb[0].mxu0
  %v5092 = vpop.f32.mrb[0].mxu0
  %v5093 = vadd.f32 %v618, %v5092
  %v5094 = vpop.f32.mrb[0].mxu0
  %5095 = vmatprep.mubr.bf16.mxu0 0
  %5096 = vmatmul.mubr.bf16.gmra.mrb[0].mxu0 %v2868
  %v5097 = vpop.f32.mrb[0].mxu0
  %v5098 = vadd.f32 %v618, %v5097
  %v5099 = vpop.f32.mrb[0].mxu0
  %v5100 = vpop.f32.mrb[0].mxu0
  %v5101 = vadd.f32 %v618, %v5100
  %v5102 = vpop.f32.mrb[0].mxu0
  %5103 = vmatprep.mubr.bf16.mxu0 0
  %5104 = vmatmul.mubr.bf16.gmra.mrb[0].mxu0 %v2871
  %v5105 = vpop.f32.mrb[0].mxu0
  %v5106 = vadd.f32 %v618, %v5105
  %v5107 = vpop.f32.mrb[0].mxu0
  %v5108 = vpop.f32.mrb[0].mxu0
  %v5109 = vadd.f32 %v618, %v5108
  %v5110 = vpop.f32.mrb[0].mxu0
  %5111 = vmatprep.mubr.bf16.mxu0 0
  %5112 = vmatmul.mubr.bf16.gmra.mrb[0].mxu0 %v2874
  %v5113 = vpop.f32.mrb[0].mxu0
  %v5114 = vadd.f32 %v618, %v5113
  %v5115 = vpop.f32.mrb[0].mxu0
  %v5116 = vpop.f32.mrb[0].mxu0
  %v5117 = vadd.f32 %v618, %v5116
  %v5118 = vpop.f32.mrb[0].mxu0
  %5119 = vmatprep.mubr.bf16.mxu0 0
  %5120 = vmatmul.mubr.bf16.gmra.mrb[0].mxu0 %v2877
  %v5121 = vpop.f32.mrb[0].mxu0
  %v5122 = vadd.f32 %v618, %v5121
  %v5123 = vpop.f32.mrb[0].mxu0
  %v5124 = vpop.f32.mrb[0].mxu0
  %v5125 = vadd.f32 %v618, %v5124
  %v5126 = vpop.f32.mrb[0].mxu0
  %5127 = vmatprep.mubr.bf16.mxu0 0
  %5128 = vmatmul.mubr.bf16.gmra.mrb[0].mxu0 %v2880
  %v5129 = vpop.f32.mrb[0].mxu0
  %v5130 = vadd.f32 %v618, %v5129
  %v5131 = vpop.f32.mrb[0].mxu0
  %v5132 = vpop.f32.mrb[0].mxu0
  %v5133 = vadd.f32 %v618, %v5132
  %v5134 = vpop.f32.mrb[0].mxu0
  %5135 = vmatprep.mubr.bf16.mxu0 0
  %5136 = vmatmul.mubr.bf16.gmra.mrb[0].mxu0 %v2883
  %v5137 = vpop.f32.mrb[0].mxu0
  %v5138 = vadd.f32 %v618, %v5137
  %v5139 = vpop.f32.mrb[0].mxu0
  %v5140 = vpop.f32.mrb[0].mxu0
  %v5141 = vadd.f32 %v618, %v5140
  %v5142 = vpop.f32.mrb[0].mxu0
  %5143 = vmatprep.mubr.bf16.mxu0 0
  %5144 = vmatmul.mubr.bf16.gmra.mrb[0].mxu0 %v2886
  %v5145 = vpop.f32.mrb[0].mxu0
  %v5146 = vadd.f32 %v618, %v5145
  %v5147 = vpop.f32.mrb[0].mxu0
  %v5148 = vpop.f32.mrb[0].mxu0
  %v5149 = vadd.f32 %v618, %v5148
  %v5150 = vpop.f32.mrb[0].mxu0
  %5151 = vmatprep.mubr.bf16.mxu0 0
  %5152 = vmatmul.mubr.bf16.gmra.mrb[0].mxu0 %v2889
  %v5153 = vpop.f32.mrb[0].mxu0
  %v5154 = vadd.f32 %v618, %v5153
  %v5155 = vpop.f32.mrb[0].mxu0
  %v5156 = vpop.f32.mrb[0].mxu0
  %v5157 = vadd.f32 %v618, %v5156
  %v5158 = vpop.f32.mrb[0].mxu0
  %5159 = vmatprep.mubr.bf16.mxu0 0
  %5160 = vmatmul.mubr.bf16.gmra.mrb[0].mxu0 %v2892
  %v5161 = vpop.f32.mrb[0].mxu0
  %v5162 = vadd.f32 %v618, %v5161
  %v5163 = vpop.f32.mrb[0].mxu0
  %v5164 = vpop.f32.mrb[0].mxu0
  %v5165 = vadd.f32 %v618, %v5164
  %v5166 = vpop.f32.mrb[0].mxu0
  %5167 = vmatprep.mubr.bf16.mxu0 0
  %5168 = vmatmul.mubr.bf16.gmra.mrb[0].mxu0 %v2895
  %v5169 = vpop.f32.mrb[0].mxu0
  %v5170 = vadd.f32 %v618, %v5169
  %v5171 = vpop.f32.mrb[0].mxu0
  %v5172 = vpop.f32.mrb[0].mxu0
  %v5173 = vadd.f32 %v618, %v5172
  %v5174 = vpop.f32.mrb[0].mxu0
  %5175 = vmatprep.mubr.bf16.mxu0 0
  %5176 = vmatmul.mubr.bf16.gmra.mrb[0].mxu0 %v2898
  %v5177 = vpop.f32.mrb[0].mxu0
  %v5178 = vadd.f32 %v618, %v5177
  %v5179 = vpop.f32.mrb[0].mxu0
  %v5180 = vpop.f32.mrb[0].mxu0
  %v5181 = vadd.f32 %v618, %v5180
  %v5182 = vpop.f32.mrb[0].mxu0
  %5183 = vmatprep.mubr.bf16.mxu0 0
  %5184 = vmatmul.mubr.bf16.gmra.mrb[0].mxu0 %v2901
  %v5185 = vpop.f32.mrb[0].mxu0
  %v5186 = vadd.f32 %v618, %v5185
  %v5187 = vpop.f32.mrb[0].mxu0
  %v5188 = vpop.f32.mrb[0].mxu0
  %v5189 = vadd.f32 %v618, %v5188
  %v5190 = vpop.f32.mrb[0].mxu0
  %5191 = vmatprep.mubr.bf16.mxu0 0
  %5192 = vmatmul.mubr.bf16.gmra.mrb[0].mxu0 %v2904
  %v5193 = vpop.f32.mrb[0].mxu0
  %v5194 = vadd.f32 %v618, %v5193
  %v5195 = vpop.f32.mrb[0].mxu0
  %v5196 = vpop.f32.mrb[0].mxu0
  %v5197 = vadd.f32 %v618, %v5196
  %v5198 = vpop.f32.mrb[0].mxu0
  %5199 = vmatprep.mubr.bf16.mxu0 0
  %5200 = vmatmul.mubr.bf16.gmra.mrb[0].mxu0 %v2907
  %v5201 = vpop.f32.mrb[0].mxu0
  %v5202 = vadd.f32 %v618, %v5201
  %v5203 = vpop.f32.mrb[0].mxu0
  %v5204 = vpop.f32.mrb[0].mxu0
  %v5205 = vadd.f32 %v618, %v5204
  %v5206 = vpop.f32.mrb[0].mxu0
  %5207 = vmatprep.mubr.bf16.mxu0 0
  %5208 = vmatmul.mubr.bf16.gmra.mrb[0].mxu0 %v2910
  %v5209 = vpop.f32.mrb[0].mxu0
  %v5210 = vadd.f32 %v618, %v5209
  %v5211 = vpop.f32.mrb[0].mxu0
  %v5212 = vpop.f32.mrb[0].mxu0
  %v5213 = vadd.f32 %v618, %v5212
  %v5214 = vpop.f32.mrb[0].mxu0
  %5215 = vmatprep.mubr.bf16.mxu0 0
  %5216 = vmatmul.mubr.bf16.gmra.mrb[0].mxu0 %v2913
  %v5217 = vpop.f32.mrb[0].mxu0
  %v5218 = vadd.f32 %v618, %v5217
  %v5219 = vpop.f32.mrb[0].mxu0
  %v5220 = vpop.f32.mrb[0].mxu0
  %v5221 = vadd.f32 %v618, %v5220
  %v5222 = vpop.f32.mrb[0].mxu0
  %5223 = vmatprep.mubr.bf16.mxu0 0
  %5224 = vmatmul.mubr.bf16.gmra.mrb[0].mxu0 %v2916
  %v5225 = vpop.f32.mrb[0].mxu0
  %v5226 = vadd.f32 %v618, %v5225
  %v5227 = vpop.f32.mrb[0].mxu0
  %v5228 = vpop.f32.mrb[0].mxu0
  %v5229 = vadd.f32 %v618, %v5228
  %v5230 = vpop.f32.mrb[0].mxu0
  %5231 = vmatprep.mubr.bf16.mxu0 0
  %5232 = vmatmul.mubr.bf16.gmra.mrb[0].mxu0 %v2919
  %v5233 = vpop.f32.mrb[0].mxu0
  %v5234 = vadd.f32 %v618, %v5233
  %v5235 = vpop.f32.mrb[0].mxu0
  %v5236 = vpop.f32.mrb[0].mxu0
  %v5237 = vadd.f32 %v618, %v5236
  %v5238 = vpop.f32.mrb[0].mxu0
  %5239 = vmatprep.mubr.bf16.mxu0 0
  %5240 = vmatmul.mubr.bf16.gmra.mrb[0].mxu0 %v2922
  %v5241 = vpop.f32.mrb[0].mxu0
  %v5242 = vadd.f32 %v618, %v5241
  %v5243 = vpop.f32.mrb[0].mxu0
  %v5244 = vpop.f32.mrb[0].mxu0
  %v5245 = vadd.f32 %v618, %v5244
  %v5246 = vpop.f32.mrb[0].mxu0
  %5247 = vmatprep.mubr.bf16.mxu0 0
  %5248 = vmatmul.mubr.bf16.gmra.mrb[0].mxu0 %v2925
  %v5249 = vpop.f32.mrb[0].mxu0
  %v5250 = vadd.f32 %v618, %v5249
  %v5251 = vpop.f32.mrb[0].mxu0
  %v5252 = vpop.f32.mrb[0].mxu0
  %v5253 = vadd.f32 %v618, %v5252
  %v5254 = vpop.f32.mrb[0].mxu0
  %5255 = vmatprep.mubr.bf16.mxu0 0
  %5256 = vmatmul.mubr.bf16.gmra.mrb[0].mxu0 %v2928
  %v5257 = vpop.f32.mrb[0].mxu0
  %v5258 = vadd.f32 %v618, %v5257
  %v5259 = vpop.f32.mrb[0].mxu0
  %v5260 = vpop.f32.mrb[0].mxu0
  %v5261 = vadd.f32 %v618, %v5260
  %v5262 = vpop.f32.mrb[0].mxu0
  %5263 = vmatprep.mubr.bf16.mxu0 0
  %5264 = vmatmul.mubr.bf16.gmra.mrb[0].mxu0 %v2931
  %v5265 = vpop.f32.mrb[0].mxu0
  %v5266 = vadd.f32 %v618, %v5265
  %v5267 = vpop.f32.mrb[0].mxu0
  %v5268 = vpop.f32.mrb[0].mxu0
  %v5269 = vadd.f32 %v618, %v5268
  %v5270 = vpop.f32.mrb[0].mxu0
  %5271 = vmatprep.mubr.bf16.mxu0 0
  %5272 = vmatmul.mubr.bf16.gmra.mrb[0].mxu0 %v2934
  %v5273 = vpop.f32.mrb[0].mxu0
  %v5274 = vadd.f32 %v618, %v5273
  %v5275 = vpop.f32.mrb[0].mxu0
  %v5276 = vpop.f32.mrb[0].mxu0
  %v5277 = vadd.f32 %v618, %v5276
  %v5278 = vpop.f32.mrb[0].mxu0
  %5279 = vdwg.mxu0
  %v5280 = vmax.f32 %v2978, 0.0
  %v5281 = vmax.f32 %v2981, 0.0
  %v5282 = vmax.f32 %v2986, 0.0
  %v5283 = vmax.f32 %v2989, 0.0
  %v5284 = vmax.f32 %v2994, 0.0
  %v5285 = vmax.f32 %v2997, 0.0
  %v5286 = vmax.f32 %v3002, 0.0
  %v5287 = vmax.f32 %v3005, 0.0
  %v5288 = vmax.f32 %v3010, 0.0
  %v5289 = vmax.f32 %v3013, 0.0
  %v5290 = vmax.f32 %v3018, 0.0
  %v5291 = vmax.f32 %v3021, 0.0
  %v5292 = vmax.f32 %v3026, 0.0
  %v5293 = vmax.f32 %v3029, 0.0
  %v5294 = vmax.f32 %v3034, 0.0
  %v5295 = vmax.f32 %v3037, 0.0
  %v5296 = vmax.f32 %v3042, 0.0
  %v5297 = vmax.f32 %v3045, 0.0
  %v5298 = vmax.f32 %v3050, 0.0
  %v5299 = vmax.f32 %v3053, 0.0
  %v5300 = vmax.f32 %v3058, 0.0
  %v5301 = vmax.f32 %v3061, 0.0
  %v5302 = vmax.f32 %v3066, 0.0
  %v5303 = vmax.f32 %v3069, 0.0
  %v5304 = vmax.f32 %v3074, 0.0
  %v5305 = vmax.f32 %v3077, 0.0
  %v5306 = vmax.f32 %v3082, 0.0
  %v5307 = vmax.f32 %v3085, 0.0
  %v5308 = vmax.f32 %v3090, 0.0
  %v5309 = vmax.f32 %v3093, 0.0
  %v5310 = vmax.f32 %v3098, 0.0
  %v5311 = vmax.f32 %v3101, 0.0
  %v5312 = vmax.f32 %v3106, 0.0
  %v5313 = vmax.f32 %v3109, 0.0
  %v5314 = vmax.f32 %v3114, 0.0
  %v5315 = vmax.f32 %v3117, 0.0
  %v5316 = vmax.f32 %v3122, 0.0
  %v5317 = vmax.f32 %v3125, 0.0
  %v5318 = vmax.f32 %v3130, 0.0
  %v5319 = vmax.f32 %v3133, 0.0
  %v5320 = vmax.f32 %v3138, 0.0
  %v5321 = vmax.f32 %v3141, 0.0
  %v5322 = vmax.f32 %v3146, 0.0
  %v5323 = vmax.f32 %v3149, 0.0
  %v5324 = vmax.f32 %v3154, 0.0
  %v5325 = vmax.f32 %v3157, 0.0
  %v5326 = vmax.f32 %v3162, 0.0
  %v5327 = vmax.f32 %v3165, 0.0
  %v5328 = vmax.f32 %v3170, 0.0
  %v5329 = vmax.f32 %v3173, 0.0
  %v5330 = vmax.f32 %v3178, 0.0
  %v5331 = vmax.f32 %v3181, 0.0
  %v5332 = vmax.f32 %v3186, 0.0
  %v5333 = vmax.f32 %v3189, 0.0
  %v5334 = vmax.f32 %v3194, 0.0
  %v5335 = vmax.f32 %v3197, 0.0
  %v5336 = vmax.f32 %v3202, 0.0
  %v5337 = vmax.f32 %v3205, 0.0
  %v5338 = vmax.f32 %v3210, 0.0
  %v5339 = vmax.f32 %v3213, 0.0
  %v5340 = vmax.f32 %v3218, 0.0
  %v5341 = vmax.f32 %v3221, 0.0
  %v5342 = vmax.f32 %v3226, 0.0
  %v5343 = vmax.f32 %v3229, 0.0
  %v5344 = vmax.f32 %v3234, 0.0
  %v5345 = vmax.f32 %v3237, 0.0
  %v5346 = vmax.f32 %v3242, 0.0
  %v5347 = vmax.f32 %v3245, 0.0
  %v5348 = vmax.f32 %v3250, 0.0
  %v5349 = vmax.f32 %v3253, 0.0
  %v5350 = vmax.f32 %v3258, 0.0
  %v5351 = vmax.f32 %v3261, 0.0
  %v5352 = vmax.f32 %v3266, 0.0
  %v5353 = vmax.f32 %v3269, 0.0
  %v5354 = vmax.f32 %v3274, 0.0
  %v5355 = vmax.f32 %v3277, 0.0
  %v5356 = vmax.f32 %v3282, 0.0
  %v5357 = vmax.f32 %v3285, 0.0
  %v5358 = vmax.f32 %v3290, 0.0
  %v5359 = vmax.f32 %v3293, 0.0
  %v5360 = vmax.f32 %v3298, 0.0
  %v5361 = vmax.f32 %v3301, 0.0
  %v5362 = vmax.f32 %v3306, 0.0
  %v5363 = vmax.f32 %v3309, 0.0
  %v5364 = vmax.f32 %v3314, 0.0
  %v5365 = vmax.f32 %v3317, 0.0
  %v5366 = vmax.f32 %v3322, 0.0
  %v5367 = vmax.f32 %v3325, 0.0
  %v5368 = vmax.f32 %v3330, 0.0
  %v5369 = vmax.f32 %v3333, 0.0
  %v5370 = vmax.f32 %v3338, 0.0
  %v5371 = vmax.f32 %v3341, 0.0
  %v5372 = vmax.f32 %v3346, 0.0
  %v5373 = vmax.f32 %v3349, 0.0
  %v5374 = vmax.f32 %v3354, 0.0
  %v5375 = vmax.f32 %v3357, 0.0
  %v5376 = vmax.f32 %v3362, 0.0
  %v5377 = vmax.f32 %v3365, 0.0
  %v5378 = vmax.f32 %v3370, 0.0
  %v5379 = vmax.f32 %v3373, 0.0
  %v5380 = vmax.f32 %v3378, 0.0
  %v5381 = vmax.f32 %v3381, 0.0
  %v5382 = vmax.f32 %v3386, 0.0
  %v5383 = vmax.f32 %v3389, 0.0
  %v5384 = vmax.f32 %v3394, 0.0
  %v5385 = vmax.f32 %v3397, 0.0
  %v5386 = vmax.f32 %v3402, 0.0
  %v5387 = vmax.f32 %v3405, 0.0
  %v5388 = vmax.f32 %v3410, 0.0
  %v5389 = vmax.f32 %v3413, 0.0
  %v5390 = vmax.f32 %v3418, 0.0
  %v5391 = vmax.f32 %v3421, 0.0
  %v5392 = vmax.f32 %v3426, 0.0
  %v5393 = vmax.f32 %v3429, 0.0
  %v5394 = vmax.f32 %v3434, 0.0
  %v5395 = vmax.f32 %v3437, 0.0
  %v5396 = vmax.f32 %v3442, 0.0
  %v5397 = vmax.f32 %v3445, 0.0
  %v5398 = vmax.f32 %v3450, 0.0
  %v5399 = vmax.f32 %v3453, 0.0
  %v5400 = vmax.f32 %v3458, 0.0
  %v5401 = vmax.f32 %v3461, 0.0
  %v5402 = vmax.f32 %v3466, 0.0
  %v5403 = vmax.f32 %v3469, 0.0
  %v5404 = vmax.f32 %v3474, 0.0
  %v5405 = vmax.f32 %v3477, 0.0
  %v5406 = vmax.f32 %v3482, 0.0
  %v5407 = vmax.f32 %v3485, 0.0
  %v5408 = vmax.f32 %v3490, 0.0
  %v5409 = vmax.f32 %v3493, 0.0
  %v5410 = vmax.f32 %v3498, 0.0
  %v5411 = vmax.f32 %v3501, 0.0
  %v5412 = vmax.f32 %v3506, 0.0
  %v5413 = vmax.f32 %v3509, 0.0
  %v5414 = vmax.f32 %v3514, 0.0
  %v5415 = vmax.f32 %v3517, 0.0
  %v5416 = vmax.f32 %v3522, 0.0
  %v5417 = vmax.f32 %v3525, 0.0
  %v5418 = vmax.f32 %v3530, 0.0
  %v5419 = vmax.f32 %v3533, 0.0
  %v5420 = vmax.f32 %v3538, 0.0
  %v5421 = vmax.f32 %v3541, 0.0
  %v5422 = vmax.f32 %v3546, 0.0
  %v5423 = vmax.f32 %v3549, 0.0
  %v5424 = vmax.f32 %v3554, 0.0
  %v5425 = vmax.f32 %v3557, 0.0
  %v5426 = vmax.f32 %v3562, 0.0
  %v5427 = vmax.f32 %v3565, 0.0
  %v5428 = vmax.f32 %v3570, 0.0
  %v5429 = vmax.f32 %v3573, 0.0
  %v5430 = vmax.f32 %v3578, 0.0
  %v5431 = vmax.f32 %v3581, 0.0
  %v5432 = vmax.f32 %v3586, 0.0
  %v5433 = vmax.f32 %v3589, 0.0
  %v5434 = vmax.f32 %v3594, 0.0
  %v5435 = vmax.f32 %v3597, 0.0
  %v5436 = vmax.f32 %v3602, 0.0
  %v5437 = vmax.f32 %v3605, 0.0
  %v5438 = vmax.f32 %v3610, 0.0
  %v5439 = vmax.f32 %v3613, 0.0
  %v5440 = vmax.f32 %v3618, 0.0
  %v5441 = vmax.f32 %v3621, 0.0
  %v5442 = vmax.f32 %v3626, 0.0
  %v5443 = vmax.f32 %v3629, 0.0
  %v5444 = vmax.f32 %v3634, 0.0
  %v5445 = vmax.f32 %v3637, 0.0
  %v5446 = vmax.f32 %v3642, 0.0
  %v5447 = vmax.f32 %v3645, 0.0
  %v5448 = vmax.f32 %v3650, 0.0
  %v5449 = vmax.f32 %v3653, 0.0
  %v5450 = vmax.f32 %v3658, 0.0
  %v5451 = vmax.f32 %v3661, 0.0
  %v5452 = vmax.f32 %v3666, 0.0
  %v5453 = vmax.f32 %v3669, 0.0
  %v5454 = vmax.f32 %v3674, 0.0
  %v5455 = vmax.f32 %v3677, 0.0
  %v5456 = vmax.f32 %v3682, 0.0
  %v5457 = vmax.f32 %v3685, 0.0
  %v5458 = vmax.f32 %v3690, 0.0
  %v5459 = vmax.f32 %v3693, 0.0
  %v5460 = vmax.f32 %v3698, 0.0
  %v5461 = vmax.f32 %v3701, 0.0
  %v5462 = vmax.f32 %v3706, 0.0
  %v5463 = vmax.f32 %v3709, 0.0
  %v5464 = vmax.f32 %v3714, 0.0
  %v5465 = vmax.f32 %v3717, 0.0
  %v5466 = vmax.f32 %v3722, 0.0
  %v5467 = vmax.f32 %v3725, 0.0
  %v5468 = vmax.f32 %v3730, 0.0
  %v5469 = vmax.f32 %v3733, 0.0
  %v5470 = vmax.f32 %v3738, 0.0
  %v5471 = vmax.f32 %v3741, 0.0
  %v5472 = vmax.f32 %v3746, 0.0
  %v5473 = vmax.f32 %v3749, 0.0
  %v5474 = vmax.f32 %v3754, 0.0
  %v5475 = vmax.f32 %v3757, 0.0
  %v5476 = vmax.f32 %v3762, 0.0
  %v5477 = vmax.f32 %v3765, 0.0
  %v5478 = vmax.f32 %v3770, 0.0
  %v5479 = vmax.f32 %v3773, 0.0
  %v5480 = vmax.f32 %v3778, 0.0
  %v5481 = vmax.f32 %v3781, 0.0
  %v5482 = vmax.f32 %v3786, 0.0
  %v5483 = vmax.f32 %v3789, 0.0
  %v5484 = vmax.f32 %v3794, 0.0
  %v5485 = vmax.f32 %v3797, 0.0
  %v5486 = vmax.f32 %v3802, 0.0
  %v5487 = vmax.f32 %v3805, 0.0
  %v5488 = vmax.f32 %v3810, 0.0
  %v5489 = vmax.f32 %v3813, 0.0
  %v5490 = vmax.f32 %v3818, 0.0
  %v5491 = vmax.f32 %v3821, 0.0
  %v5492 = vmax.f32 %v3826, 0.0
  %v5493 = vmax.f32 %v3829, 0.0
  %v5494 = vmax.f32 %v3834, 0.0
  %v5495 = vmax.f32 %v3837, 0.0
  %v5496 = vmax.f32 %v3842, 0.0
  %v5497 = vmax.f32 %v3845, 0.0
  %v5498 = vmax.f32 %v3850, 0.0
  %v5499 = vmax.f32 %v3853, 0.0
  %v5500 = vmax.f32 %v3858, 0.0
  %v5501 = vmax.f32 %v3861, 0.0
  %v5502 = vmax.f32 %v3866, 0.0
  %v5503 = vmax.f32 %v3869, 0.0
  %v5504 = vmax.f32 %v3874, 0.0
  %v5505 = vmax.f32 %v3877, 0.0
  %v5506 = vmax.f32 %v3882, 0.0
  %v5507 = vmax.f32 %v3885, 0.0
  %v5508 = vmax.f32 %v3890, 0.0
  %v5509 = vmax.f32 %v3893, 0.0
  %v5510 = vmax.f32 %v3898, 0.0
  %v5511 = vmax.f32 %v3901, 0.0
  %v5512 = vmax.f32 %v3906, 0.0
  %v5513 = vmax.f32 %v3909, 0.0
  %v5514 = vmax.f32 %v3914, 0.0
  %v5515 = vmax.f32 %v3917, 0.0
  %v5516 = vmax.f32 %v3922, 0.0
  %v5517 = vmax.f32 %v3925, 0.0
  %v5518 = vmax.f32 %v3930, 0.0
  %v5519 = vmax.f32 %v3933, 0.0
  %v5520 = vmax.f32 %v3938, 0.0
  %v5521 = vmax.f32 %v3941, 0.0
  %v5522 = vmax.f32 %v3946, 0.0
  %v5523 = vmax.f32 %v3949, 0.0
  %v5524 = vmax.f32 %v3954, 0.0
  %v5525 = vmax.f32 %v3957, 0.0
  %v5526 = vmax.f32 %v3962, 0.0
  %v5527 = vmax.f32 %v3965, 0.0
  %v5528 = vmax.f32 %v3970, 0.0
  %v5529 = vmax.f32 %v3973, 0.0
  %v5530 = vmax.f32 %v3978, 0.0
  %v5531 = vmax.f32 %v3981, 0.0
  %v5532 = vmax.f32 %v3986, 0.0
  %v5533 = vmax.f32 %v3989, 0.0
  %v5534 = vmax.f32 %v3994, 0.0
  %v5535 = vmax.f32 %v3997, 0.0
  %v5536 = vmax.f32 %v4002, 0.0
  %v5537 = vmax.f32 %v4005, 0.0
  %v5538 = vmax.f32 %v4010, 0.0
  %v5539 = vmax.f32 %v4013, 0.0
  %v5540 = vmax.f32 %v4018, 0.0
  %v5541 = vmax.f32 %v4021, 0.0
  %v5542 = vmax.f32 %v4026, 0.0
  %v5543 = vmax.f32 %v4029, 0.0
  %v5544 = vmax.f32 %v4034, 0.0
  %v5545 = vmax.f32 %v4037, 0.0
  %v5546 = vmax.f32 %v4042, 0.0
  %v5547 = vmax.f32 %v4045, 0.0
  %v5548 = vmax.f32 %v4050, 0.0
  %v5549 = vmax.f32 %v4053, 0.0
  %v5550 = vmax.f32 %v4058, 0.0
  %v5551 = vmax.f32 %v4061, 0.0
  %v5552 = vmax.f32 %v4066, 0.0
  %v5553 = vmax.f32 %v4069, 0.0
  %v5554 = vmax.f32 %v4074, 0.0
  %v5555 = vmax.f32 %v4077, 0.0
  %v5556 = vmax.f32 %v4082, 0.0
  %v5557 = vmax.f32 %v4085, 0.0
  %v5558 = vmax.f32 %v4090, 0.0
  %v5559 = vmax.f32 %v4093, 0.0
  %v5560 = vmax.f32 %v4098, 0.0
  %v5561 = vmax.f32 %v4101, 0.0
  %v5562 = vmax.f32 %v4106, 0.0
  %v5563 = vmax.f32 %v4109, 0.0
  %v5564 = vmax.f32 %v4114, 0.0
  %v5565 = vmax.f32 %v4117, 0.0
  %v5566 = vmax.f32 %v4122, 0.0
  %v5567 = vmax.f32 %v4125, 0.0
  %v5568 = vmax.f32 %v4130, 0.0
  %v5569 = vmax.f32 %v4133, 0.0
  %v5570 = vmax.f32 %v4138, 0.0
  %v5571 = vmax.f32 %v4141, 0.0
  %v5572 = vmax.f32 %v4146, 0.0
  %v5573 = vmax.f32 %v4149, 0.0
  %v5574 = vmax.f32 %v4154, 0.0
  %v5575 = vmax.f32 %v4157, 0.0
  %v5576 = vmax.f32 %v4162, 0.0
  %v5577 = vmax.f32 %v4165, 0.0
  %v5578 = vmax.f32 %v4170, 0.0
  %v5579 = vmax.f32 %v4173, 0.0
  %v5580 = vmax.f32 %v4178, 0.0
  %v5581 = vmax.f32 %v4181, 0.0
  %v5582 = vmax.f32 %v4186, 0.0
  %v5583 = vmax.f32 %v4189, 0.0
  %v5584 = vmax.f32 %v4194, 0.0
  %v5585 = vmax.f32 %v4197, 0.0
  %v5586 = vmax.f32 %v4202, 0.0
  %v5587 = vmax.f32 %v4205, 0.0
  %v5588 = vmax.f32 %v4210, 0.0
  %v5589 = vmax.f32 %v4213, 0.0
  %v5590 = vmax.f32 %v4218, 0.0
  %v5591 = vmax.f32 %v4221, 0.0
  %v5592 = vmax.f32 %v4226, 0.0
  %v5593 = vmax.f32 %v4229, 0.0
  %v5594 = vmax.f32 %v4234, 0.0
  %v5595 = vmax.f32 %v4237, 0.0
  %v5596 = vmax.f32 %v4242, 0.0
  %v5597 = vmax.f32 %v4245, 0.0
  %v5598 = vmax.f32 %v4250, 0.0
  %v5599 = vmax.f32 %v4253, 0.0
  %v5600 = vmax.f32 %v4258, 0.0
  %v5601 = vmax.f32 %v4261, 0.0
  %v5602 = vmax.f32 %v4266, 0.0
  %v5603 = vmax.f32 %v4269, 0.0
  %v5604 = vmax.f32 %v4274, 0.0
  %v5605 = vmax.f32 %v4277, 0.0
  %v5606 = vmax.f32 %v4282, 0.0
  %v5607 = vmax.f32 %v4285, 0.0
  %v5608 = vmax.f32 %v4290, 0.0
  %v5609 = vmax.f32 %v4293, 0.0
  %v5610 = vmax.f32 %v4298, 0.0
  %v5611 = vmax.f32 %v4301, 0.0
  %v5612 = vmax.f32 %v4306, 0.0
  %v5613 = vmax.f32 %v4309, 0.0
  %v5614 = vmax.f32 %v4314, 0.0
  %v5615 = vmax.f32 %v4317, 0.0
  %v5616 = vmax.f32 %v4322, 0.0
  %v5617 = vmax.f32 %v4325, 0.0
  %v5618 = vmax.f32 %v4330, 0.0
  %v5619 = vmax.f32 %v4333, 0.0
  %v5620 = vmax.f32 %v4338, 0.0
  %v5621 = vmax.f32 %v4341, 0.0
  %v5622 = vmax.f32 %v4346, 0.0
  %v5623 = vmax.f32 %v4349, 0.0
  %v5624 = vmax.f32 %v4354, 0.0
  %v5625 = vmax.f32 %v4357, 0.0
  %v5626 = vmax.f32 %v4362, 0.0
  %v5627 = vmax.f32 %v4365, 0.0
  %v5628 = vmax.f32 %v4370, 0.0
  %v5629 = vmax.f32 %v4373, 0.0
  %v5630 = vmax.f32 %v4378, 0.0
  %v5631 = vmax.f32 %v4381, 0.0
  %v5632 = vmax.f32 %v4386, 0.0
  %v5633 = vmax.f32 %v4389, 0.0
  %v5634 = vmax.f32 %v4394, 0.0
  %v5635 = vmax.f32 %v4397, 0.0
  %v5636 = vmax.f32 %v4402, 0.0
  %v5637 = vmax.f32 %v4405, 0.0
  %v5638 = vmax.f32 %v4410, 0.0
  %v5639 = vmax.f32 %v4413, 0.0
  %v5640 = vmax.f32 %v4418, 0.0
  %v5641 = vmax.f32 %v4421, 0.0
  %v5642 = vmax.f32 %v4426, 0.0
  %v5643 = vmax.f32 %v4429, 0.0
  %v5644 = vmax.f32 %v4434, 0.0
  %v5645 = vmax.f32 %v4437, 0.0
  %v5646 = vmax.f32 %v4442, 0.0
  %v5647 = vmax.f32 %v4445, 0.0
  %v5648 = vmax.f32 %v4450, 0.0
  %v5649 = vmax.f32 %v4453, 0.0
  %v5650 = vmax.f32 %v4458, 0.0
  %v5651 = vmax.f32 %v4461, 0.0
  %v5652 = vmax.f32 %v4466, 0.0
  %v5653 = vmax.f32 %v4469, 0.0
  %v5654 = vmax.f32 %v4474, 0.0
  %v5655 = vmax.f32 %v4477, 0.0
  %v5656 = vmax.f32 %v4482, 0.0
  %v5657 = vmax.f32 %v4485, 0.0
  %v5658 = vmax.f32 %v4490, 0.0
  %v5659 = vmax.f32 %v4493, 0.0
  %v5660 = vmax.f32 %v4498, 0.0
  %v5661 = vmax.f32 %v4501, 0.0
  %v5662 = vmax.f32 %v4506, 0.0
  %v5663 = vmax.f32 %v4509, 0.0
  %v5664 = vmax.f32 %v4514, 0.0
  %v5665 = vmax.f32 %v4517, 0.0
  %v5666 = vmax.f32 %v4522, 0.0
  %v5667 = vmax.f32 %v4525, 0.0
  %v5668 = vmax.f32 %v4530, 0.0
  %v5669 = vmax.f32 %v4533, 0.0
  %v5670 = vmax.f32 %v4538, 0.0
  %v5671 = vmax.f32 %v4541, 0.0
  %v5672 = vmax.f32 %v4546, 0.0
  %v5673 = vmax.f32 %v4549, 0.0
  %v5674 = vmax.f32 %v4554, 0.0
  %v5675 = vmax.f32 %v4557, 0.0
  %v5676 = vmax.f32 %v4562, 0.0
  %v5677 = vmax.f32 %v4565, 0.0
  %v5678 = vmax.f32 %v4570, 0.0
  %v5679 = vmax.f32 %v4573, 0.0
  %v5680 = vmax.f32 %v4578, 0.0
  %v5681 = vmax.f32 %v4581, 0.0
  %v5682 = vmax.f32 %v4586, 0.0
  %v5683 = vmax.f32 %v4589, 0.0
  %v5684 = vmax.f32 %v4594, 0.0
  %v5685 = vmax.f32 %v4597, 0.0
  %v5686 = vmax.f32 %v4602, 0.0
  %v5687 = vmax.f32 %v4605, 0.0
  %v5688 = vmax.f32 %v4610, 0.0
  %v5689 = vmax.f32 %v4613, 0.0
  %v5690 = vmax.f32 %v4618, 0.0
  %v5691 = vmax.f32 %v4621, 0.0
  %v5692 = vmax.f32 %v4626, 0.0
  %v5693 = vmax.f32 %v4629, 0.0
  %v5694 = vmax.f32 %v4634, 0.0
  %v5695 = vmax.f32 %v4637, 0.0
  %v5696 = vmax.f32 %v4642, 0.0
  %v5697 = vmax.f32 %v4645, 0.0
  %v5698 = vmax.f32 %v4650, 0.0
  %v5699 = vmax.f32 %v4653, 0.0
  %v5700 = vmax.f32 %v4658, 0.0
  %v5701 = vmax.f32 %v4661, 0.0
  %v5702 = vmax.f32 %v4666, 0.0
  %v5703 = vmax.f32 %v4669, 0.0
  %v5704 = vmax.f32 %v4674, 0.0
  %v5705 = vmax.f32 %v4677, 0.0
  %v5706 = vmax.f32 %v4682, 0.0
  %v5707 = vmax.f32 %v4685, 0.0
  %v5708 = vmax.f32 %v4690, 0.0
  %v5709 = vmax.f32 %v4693, 0.0
  %v5710 = vmax.f32 %v4698, 0.0
  %v5711 = vmax.f32 %v4701, 0.0
  %v5712 = vmax.f32 %v4706, 0.0
  %v5713 = vmax.f32 %v4709, 0.0
  %v5714 = vmax.f32 %v4714, 0.0
  %v5715 = vmax.f32 %v4717, 0.0
  %v5716 = vmax.f32 %v4722, 0.0
  %v5717 = vmax.f32 %v4725, 0.0
  %v5718 = vmax.f32 %v4730, 0.0
  %v5719 = vmax.f32 %v4733, 0.0
  %v5720 = vmax.f32 %v4738, 0.0
  %v5721 = vmax.f32 %v4741, 0.0
  %v5722 = vmax.f32 %v4746, 0.0
  %v5723 = vmax.f32 %v4749, 0.0
  %v5724 = vmax.f32 %v4754, 0.0
  %v5725 = vmax.f32 %v4757, 0.0
  %v5726 = vmax.f32 %v4762, 0.0
  %v5727 = vmax.f32 %v4765, 0.0
  %v5728 = vmax.f32 %v4770, 0.0
  %v5729 = vmax.f32 %v4773, 0.0
  %v5730 = vmax.f32 %v4778, 0.0
  %v5731 = vmax.f32 %v4781, 0.0
  %v5732 = vmax.f32 %v4786, 0.0
  %v5733 = vmax.f32 %v4789, 0.0
  %v5734 = vmax.f32 %v4794, 0.0
  %v5735 = vmax.f32 %v4797, 0.0
  %v5736 = vmax.f32 %v4802, 0.0
  %v5737 = vmax.f32 %v4805, 0.0
  %v5738 = vmax.f32 %v4810, 0.0
  %v5739 = vmax.f32 %v4813, 0.0
  %v5740 = vmax.f32 %v4818, 0.0
  %v5741 = vmax.f32 %v4821, 0.0
  %v5742 = vmax.f32 %v4826, 0.0
  %v5743 = vmax.f32 %v4829, 0.0
  %v5744 = vmax.f32 %v4834, 0.0
  %v5745 = vmax.f32 %v4837, 0.0
  %v5746 = vmax.f32 %v4842, 0.0
  %v5747 = vmax.f32 %v4845, 0.0
  %v5748 = vmax.f32 %v4850, 0.0
  %v5749 = vmax.f32 %v4853, 0.0
  %v5750 = vmax.f32 %v4858, 0.0
  %v5751 = vmax.f32 %v4861, 0.0
  %v5752 = vmax.f32 %v4866, 0.0
  %v5753 = vmax.f32 %v4869, 0.0
  %v5754 = vmax.f32 %v4874, 0.0
  %v5755 = vmax.f32 %v4877, 0.0
  %v5756 = vmax.f32 %v4882, 0.0
  %v5757 = vmax.f32 %v4885, 0.0
  %v5758 = vmax.f32 %v4890, 0.0
  %v5759 = vmax.f32 %v4893, 0.0
  %v5760 = vmax.f32 %v4898, 0.0
  %v5761 = vmax.f32 %v4901, 0.0
  %v5762 = vmax.f32 %v4906, 0.0
  %v5763 = vmax.f32 %v4909, 0.0
  %v5764 = vmax.f32 %v4914, 0.0
  %v5765 = vmax.f32 %v4917, 0.0
  %v5766 = vmax.f32 %v4922, 0.0
  %v5767 = vmax.f32 %v4925, 0.0
  %v5768 = vmax.f32 %v4930, 0.0
  %v5769 = vmax.f32 %v4933, 0.0
  %v5770 = vmax.f32 %v4938, 0.0
  %v5771 = vmax.f32 %v4941, 0.0
  %v5772 = vmax.f32 %v4946, 0.0
  %v5773 = vmax.f32 %v4949, 0.0
  %v5774 = vmax.f32 %v4954, 0.0
  %v5775 = vmax.f32 %v4957, 0.0
  %v5776 = vmax.f32 %v4962, 0.0
  %v5777 = vmax.f32 %v4965, 0.0
  %v5778 = vmax.f32 %v4970, 0.0
  %v5779 = vmax.f32 %v4973, 0.0
  %v5780 = vmax.f32 %v4978, 0.0
  %v5781 = vmax.f32 %v4981, 0.0
  %v5782 = vmax.f32 %v4986, 0.0
  %v5783 = vmax.f32 %v4989, 0.0
  %v5784 = vmax.f32 %v4994, 0.0
  %v5785 = vmax.f32 %v4997, 0.0
  %v5786 = vmax.f32 %v5002, 0.0
  %v5787 = vmax.f32 %v5005, 0.0
  %v5788 = vmax.f32 %v5010, 0.0
  %v5789 = vmax.f32 %v5013, 0.0
  %v5790 = vmax.f32 %v5018, 0.0
  %v5791 = vmax.f32 %v5021, 0.0
  %v5792 = vmax.f32 %v5026, 0.0
  %v5793 = vmax.f32 %v5029, 0.0
  %v5794 = vmax.f32 %v5034, 0.0
  %v5795 = vmax.f32 %v5037, 0.0
  %v5796 = vmax.f32 %v5042, 0.0
  %v5797 = vmax.f32 %v5045, 0.0
  %v5798 = vmax.f32 %v5050, 0.0
  %v5799 = vmax.f32 %v5053, 0.0
  %v5800 = vmax.f32 %v5058, 0.0
  %v5801 = vmax.f32 %v5061, 0.0
  %v5802 = vmax.f32 %v5066, 0.0
  %v5803 = vmax.f32 %v5069, 0.0
  %v5804 = vmax.f32 %v5074, 0.0
  %v5805 = vmax.f32 %v5077, 0.0
  %v5806 = vmax.f32 %v5082, 0.0
  %v5807 = vmax.f32 %v5085, 0.0
  %v5808 = vmax.f32 %v5090, 0.0
  %v5809 = vmax.f32 %v5093, 0.0
  %v5810 = vmax.f32 %v5098, 0.0
  %v5811 = vmax.f32 %v5101, 0.0
  %v5812 = vmax.f32 %v5106, 0.0
  %v5813 = vmax.f32 %v5109, 0.0
  %v5814 = vmax.f32 %v5114, 0.0
  %v5815 = vmax.f32 %v5117, 0.0
  %v5816 = vmax.f32 %v5122, 0.0
  %v5817 = vmax.f32 %v5125, 0.0
  %v5818 = vmax.f32 %v5130, 0.0
  %v5819 = vmax.f32 %v5133, 0.0
  %v5820 = vmax.f32 %v5138, 0.0
  %v5821 = vmax.f32 %v5141, 0.0
  %v5822 = vmax.f32 %v5146, 0.0
  %v5823 = vmax.f32 %v5149, 0.0
  %v5824 = vmax.f32 %v5154, 0.0
  %v5825 = vmax.f32 %v5157, 0.0
  %v5826 = vmax.f32 %v5162, 0.0
  %v5827 = vmax.f32 %v5165, 0.0
  %v5828 = vmax.f32 %v5170, 0.0
  %v5829 = vmax.f32 %v5173, 0.0
  %v5830 = vmax.f32 %v5178, 0.0
  %v5831 = vmax.f32 %v5181, 0.0
  %v5832 = vmax.f32 %v5186, 0.0
  %v5833 = vmax.f32 %v5189, 0.0
  %v5834 = vmax.f32 %v5194, 0.0
  %v5835 = vmax.f32 %v5197, 0.0
  %v5836 = vmax.f32 %v5202, 0.0
  %v5837 = vmax.f32 %v5205, 0.0
  %v5838 = vmax.f32 %v5210, 0.0
  %v5839 = vmax.f32 %v5213, 0.0
  %v5840 = vmax.f32 %v5218, 0.0
  %v5841 = vmax.f32 %v5221, 0.0
  %v5842 = vmax.f32 %v5226, 0.0
  %v5843 = vmax.f32 %v5229, 0.0
  %v5844 = vmax.f32 %v5234, 0.0
  %v5845 = vmax.f32 %v5237, 0.0
  %v5846 = vmax.f32 %v5242, 0.0
  %v5847 = vmax.f32 %v5245, 0.0
  %v5848 = vmax.f32 %v5250, 0.0
  %v5849 = vmax.f32 %v5253, 0.0
  %v5850 = vmax.f32 %v5258, 0.0
  %v5851 = vmax.f32 %v5261, 0.0
  %v5852 = vmax.f32 %v5266, 0.0
  %v5853 = vmax.f32 %v5269, 0.0
  %v5854 = vmax.f32 %v5274, 0.0
  %v5855 = vmax.f32 %v5277, 0.0
  %v5856 = vmax.f32 %v5280, %v5281
  %v5857 = vmax.f32 %v5282, %v5283
  %v5858 = vmax.f32 %v5284, %v5285
  %v5859 = vmax.f32 %v5286, %v5287
  %v5860 = vmax.f32 %v5288, %v5289
  %v5861 = vmax.f32 %v5290, %v5291
  %v5862 = vmax.f32 %v5292, %v5293
  %v5863 = vmax.f32 %v5294, %v5295
  %v5864 = vmax.f32 %v5296, %v5297
  %v5865 = vmax.f32 %v5298, %v5299
  %v5866 = vmax.f32 %v5300, %v5301
  %v5867 = vmax.f32 %v5302, %v5303
  %v5868 = vmax.f32 %v5304, %v5305
  %v5869 = vmax.f32 %v5306, %v5307
  %v5870 = vmax.f32 %v5308, %v5309
  %v5871 = vmax.f32 %v5310, %v5311
  %v5872 = vmax.f32 %v5312, %v5313
  %v5873 = vmax.f32 %v5314, %v5315
  %v5874 = vmax.f32 %v5316, %v5317
  %v5875 = vmax.f32 %v5318, %v5319
  %v5876 = vmax.f32 %v5320, %v5321
  %v5877 = vmax.f32 %v5322, %v5323
  %v5878 = vmax.f32 %v5324, %v5325
  %v5879 = vmax.f32 %v5326, %v5327
  %v5880 = vmax.f32 %v5328, %v5329
  %v5881 = vmax.f32 %v5330, %v5331
  %v5882 = vmax.f32 %v5332, %v5333
  %v5883 = vmax.f32 %v5334, %v5335
  %v5884 = vmax.f32 %v5336, %v5337
  %v5885 = vmax.f32 %v5338, %v5339
  %v5886 = vmax.f32 %v5340, %v5341
  %v5887 = vmax.f32 %v5342, %v5343
  %v5888 = vmax.f32 %v5344, %v5345
  %v5889 = vmax.f32 %v5346, %v5347
  %v5890 = vmax.f32 %v5348, %v5349
  %v5891 = vmax.f32 %v5350, %v5351
  %v5892 = vmax.f32 %v5352, %v5353
  %v5893 = vmax.f32 %v5354, %v5355
  %v5894 = vmax.f32 %v5356, %v5357
  %v5895 = vmax.f32 %v5358, %v5359
  %v5896 = vmax.f32 %v5360, %v5361
  %v5897 = vmax.f32 %v5362, %v5363
  %v5898 = vmax.f32 %v5364, %v5365
  %v5899 = vmax.f32 %v5366, %v5367
  %v5900 = vmax.f32 %v5368, %v5369
  %v5901 = vmax.f32 %v5370, %v5371
  %v5902 = vmax.f32 %v5372, %v5373
  %v5903 = vmax.f32 %v5374, %v5375
  %v5904 = vmax.f32 %v5376, %v5377
  %v5905 = vmax.f32 %v5378, %v5379
  %v5906 = vmax.f32 %v5380, %v5381
  %v5907 = vmax.f32 %v5382, %v5383
  %v5908 = vmax.f32 %v5384, %v5385
  %v5909 = vmax.f32 %v5386, %v5387
  %v5910 = vmax.f32 %v5388, %v5389
  %v5911 = vmax.f32 %v5390, %v5391
  %v5912 = vmax.f32 %v5392, %v5393
  %v5913 = vmax.f32 %v5394, %v5395
  %v5914 = vmax.f32 %v5396, %v5397
  %v5915 = vmax.f32 %v5398, %v5399
  %v5916 = vmax.f32 %v5400, %v5401
  %v5917 = vmax.f32 %v5402, %v5403
  %v5918 = vmax.f32 %v5404, %v5405
  %v5919 = vmax.f32 %v5406, %v5407
  %v5920 = vmax.f32 %v5408, %v5409
  %v5921 = vmax.f32 %v5410, %v5411
  %v5922 = vmax.f32 %v5412, %v5413
  %v5923 = vmax.f32 %v5414, %v5415
  %v5924 = vmax.f32 %v5416, %v5417
  %v5925 = vmax.f32 %v5418, %v5419
  %v5926 = vmax.f32 %v5420, %v5421
  %v5927 = vmax.f32 %v5422, %v5423
  %v5928 = vmax.f32 %v5424, %v5425
  %v5929 = vmax.f32 %v5426, %v5427
  %v5930 = vmax.f32 %v5428, %v5429
  %v5931 = vmax.f32 %v5430, %v5431
  %v5932 = vmax.f32 %v5432, %v5433
  %v5933 = vmax.f32 %v5434, %v5435
  %v5934 = vmax.f32 %v5436, %v5437
  %v5935 = vmax.f32 %v5438, %v5439
  %v5936 = vmax.f32 %v5440, %v5441
  %v5937 = vmax.f32 %v5442, %v5443
  %v5938 = vmax.f32 %v5444, %v5445
  %v5939 = vmax.f32 %v5446, %v5447
  %v5940 = vmax.f32 %v5448, %v5449
  %v5941 = vmax.f32 %v5450, %v5451
  %v5942 = vmax.f32 %v5452, %v5453
  %v5943 = vmax.f32 %v5454, %v5455
  %v5944 = vmax.f32 %v5456, %v5457
  %v5945 = vmax.f32 %v5458, %v5459
  %v5946 = vmax.f32 %v5460, %v5461
  %v5947 = vmax.f32 %v5462, %v5463
  %v5948 = vmax.f32 %v5464, %v5465
  %v5949 = vmax.f32 %v5466, %v5467
  %v5950 = vmax.f32 %v5468, %v5469
  %v5951 = vmax.f32 %v5470, %v5471
  %v5952 = vmax.f32 %v5472, %v5473
  %v5953 = vmax.f32 %v5474, %v5475
  %v5954 = vmax.f32 %v5476, %v5477
  %v5955 = vmax.f32 %v5478, %v5479
  %v5956 = vmax.f32 %v5480, %v5481
  %v5957 = vmax.f32 %v5482, %v5483
  %v5958 = vmax.f32 %v5484, %v5485
  %v5959 = vmax.f32 %v5486, %v5487
  %v5960 = vmax.f32 %v5488, %v5489
  %v5961 = vmax.f32 %v5490, %v5491
  %v5962 = vmax.f32 %v5492, %v5493
  %v5963 = vmax.f32 %v5494, %v5495
  %v5964 = vmax.f32 %v5496, %v5497
  %v5965 = vmax.f32 %v5498, %v5499
  %v5966 = vmax.f32 %v5500, %v5501
  %v5967 = vmax.f32 %v5502, %v5503
  %v5968 = vmax.f32 %v5504, %v5505
  %v5969 = vmax.f32 %v5506, %v5507
  %v5970 = vmax.f32 %v5508, %v5509
  %v5971 = vmax.f32 %v5510, %v5511
  %v5972 = vmax.f32 %v5512, %v5513
  %v5973 = vmax.f32 %v5514, %v5515
  %v5974 = vmax.f32 %v5516, %v5517
  %v5975 = vmax.f32 %v5518, %v5519
  %v5976 = vmax.f32 %v5520, %v5521
  %v5977 = vmax.f32 %v5522, %v5523
  %v5978 = vmax.f32 %v5524, %v5525
  %v5979 = vmax.f32 %v5526, %v5527
  %v5980 = vmax.f32 %v5528, %v5529
  %v5981 = vmax.f32 %v5530, %v5531
  %v5982 = vmax.f32 %v5532, %v5533
  %v5983 = vmax.f32 %v5534, %v5535
  %v5984 = vmax.f32 %v5536, %v5537
  %v5985 = vmax.f32 %v5538, %v5539
  %v5986 = vmax.f32 %v5540, %v5541
  %v5987 = vmax.f32 %v5542, %v5543
  %v5988 = vmax.f32 %v5544, %v5545
  %v5989 = vmax.f32 %v5546, %v5547
  %v5990 = vmax.f32 %v5548, %v5549
  %v5991 = vmax.f32 %v5550, %v5551
  %v5992 = vmax.f32 %v5552, %v5553
  %v5993 = vmax.f32 %v5554, %v5555
  %v5994 = vmax.f32 %v5556, %v5557
  %v5995 = vmax.f32 %v5558, %v5559
  %v5996 = vmax.f32 %v5560, %v5561
  %v5997 = vmax.f32 %v5562, %v5563
  %v5998 = vmax.f32 %v5564, %v5565
  %v5999 = vmax.f32 %v5566, %v5567
  %v6000 = vmax.f32 %v5568, %v5569
  %v6001 = vmax.f32 %v5570, %v5571
  %v6002 = vmax.f32 %v5572, %v5573
  %v6003 = vmax.f32 %v5574, %v5575
  %v6004 = vmax.f32 %v5576, %v5577
  %v6005 = vmax.f32 %v5578, %v5579
  %v6006 = vmax.f32 %v5580, %v5581
  %v6007 = vmax.f32 %v5582, %v5583
  %v6008 = vmax.f32 %v5584, %v5585
  %v6009 = vmax.f32 %v5586, %v5587
  %v6010 = vmax.f32 %v5588, %v5589
  %v6011 = vmax.f32 %v5590, %v5591
  %v6012 = vmax.f32 %v5592, %v5593
  %v6013 = vmax.f32 %v5594, %v5595
  %v6014 = vmax.f32 %v5596, %v5597
  %v6015 = vmax.f32 %v5598, %v5599
  %v6016 = vmax.f32 %v5600, %v5601
  %v6017 = vmax.f32 %v5602, %v5603
  %v6018 = vmax.f32 %v5604, %v5605
  %v6019 = vmax.f32 %v5606, %v5607
  %v6020 = vmax.f32 %v5608, %v5609
  %v6021 = vmax.f32 %v5610, %v5611
  %v6022 = vmax.f32 %v5612, %v5613
  %v6023 = vmax.f32 %v5614, %v5615
  %v6024 = vmax.f32 %v5616, %v5617
  %v6025 = vmax.f32 %v5618, %v5619
  %v6026 = vmax.f32 %v5620, %v5621
  %v6027 = vmax.f32 %v5622, %v5623
  %v6028 = vmax.f32 %v5624, %v5625
  %v6029 = vmax.f32 %v5626, %v5627
  %v6030 = vmax.f32 %v5628, %v5629
  %v6031 = vmax.f32 %v5630, %v5631
  %v6032 = vmax.f32 %v5632, %v5633
  %v6033 = vmax.f32 %v5634, %v5635
  %v6034 = vmax.f32 %v5636, %v5637
  %v6035 = vmax.f32 %v5638, %v5639
  %v6036 = vmax.f32 %v5640, %v5641
  %v6037 = vmax.f32 %v5642, %v5643
  %v6038 = vmax.f32 %v5644, %v5645
  %v6039 = vmax.f32 %v5646, %v5647
  %v6040 = vmax.f32 %v5648, %v5649
  %v6041 = vmax.f32 %v5650, %v5651
  %v6042 = vmax.f32 %v5652, %v5653
  %v6043 = vmax.f32 %v5654, %v5655
  %v6044 = vmax.f32 %v5656, %v5657
  %v6045 = vmax.f32 %v5658, %v5659
  %v6046 = vmax.f32 %v5660, %v5661
  %v6047 = vmax.f32 %v5662, %v5663
  %v6048 = vmax.f32 %v5664, %v5665
  %v6049 = vmax.f32 %v5666, %v5667
  %v6050 = vmax.f32 %v5668, %v5669
  %v6051 = vmax.f32 %v5670, %v5671
  %v6052 = vmax.f32 %v5672, %v5673
  %v6053 = vmax.f32 %v5674, %v5675
  %v6054 = vmax.f32 %v5676, %v5677
  %v6055 = vmax.f32 %v5678, %v5679
  %v6056 = vmax.f32 %v5680, %v5681
  %v6057 = vmax.f32 %v5682, %v5683
  %v6058 = vmax.f32 %v5684, %v5685
  %v6059 = vmax.f32 %v5686, %v5687
  %v6060 = vmax.f32 %v5688, %v5689
  %v6061 = vmax.f32 %v5690, %v5691
  %v6062 = vmax.f32 %v5692, %v5693
  %v6063 = vmax.f32 %v5694, %v5695
  %v6064 = vmax.f32 %v5696, %v5697
  %v6065 = vmax.f32 %v5698, %v5699
  %v6066 = vmax.f32 %v5700, %v5701
  %v6067 = vmax.f32 %v5702, %v5703
  %v6068 = vmax.f32 %v5704, %v5705
  %v6069 = vmax.f32 %v5706, %v5707
  %v6070 = vmax.f32 %v5708, %v5709
  %v6071 = vmax.f32 %v5710, %v5711
  %v6072 = vmax.f32 %v5712, %v5713
  %v6073 = vmax.f32 %v5714, %v5715
  %v6074 = vmax.f32 %v5716, %v5717
  %v6075 = vmax.f32 %v5718, %v5719
  %v6076 = vmax.f32 %v5720, %v5721
  %v6077 = vmax.f32 %v5722, %v5723
  %v6078 = vmax.f32 %v5724, %v5725
  %v6079 = vmax.f32 %v5726, %v5727
  %v6080 = vmax.f32 %v5728, %v5729
  %v6081 = vmax.f32 %v5730, %v5731
  %v6082 = vmax.f32 %v5732, %v5733
  %v6083 = vmax.f32 %v5734, %v5735
  %v6084 = vmax.f32 %v5736, %v5737
  %v6085 = vmax.f32 %v5738, %v5739
  %v6086 = vmax.f32 %v5740, %v5741
  %v6087 = vmax.f32 %v5742, %v5743
  %v6088 = vmax.f32 %v5744, %v5745
  %v6089 = vmax.f32 %v5746, %v5747
  %v6090 = vmax.f32 %v5748, %v5749
  %v6091 = vmax.f32 %v5750, %v5751
  %v6092 = vmax.f32 %v5752, %v5753
  %v6093 = vmax.f32 %v5754, %v5755
  %v6094 = vmax.f32 %v5756, %v5757
  %v6095 = vmax.f32 %v5758, %v5759
  %v6096 = vmax.f32 %v5760, %v5761
  %v6097 = vmax.f32 %v5762, %v5763
  %v6098 = vmax.f32 %v5764, %v5765
  %v6099 = vmax.f32 %v5766, %v5767
  %v6100 = vmax.f32 %v5768, %v5769
  %v6101 = vmax.f32 %v5770, %v5771
  %v6102 = vmax.f32 %v5772, %v5773
  %v6103 = vmax.f32 %v5774, %v5775
  %v6104 = vmax.f32 %v5776, %v5777
  %v6105 = vmax.f32 %v5778, %v5779
  %v6106 = vmax.f32 %v5780, %v5781
  %v6107 = vmax.f32 %v5782, %v5783
  %v6108 = vmax.f32 %v5784, %v5785
  %v6109 = vmax.f32 %v5786, %v5787
  %v6110 = vmax.f32 %v5788, %v5789
  %v6111 = vmax.f32 %v5790, %v5791
  %v6112 = vmax.f32 %v5792, %v5793
  %v6113 = vmax.f32 %v5794, %v5795
  %v6114 = vmax.f32 %v5796, %v5797
  %v6115 = vmax.f32 %v5798, %v5799
  %v6116 = vmax.f32 %v5800, %v5801
  %v6117 = vmax.f32 %v5802, %v5803
  %v6118 = vmax.f32 %v5804, %v5805
  %v6119 = vmax.f32 %v5806, %v5807
  %v6120 = vmax.f32 %v5808, %v5809
  %v6121 = vmax.f32 %v5810, %v5811
  %v6122 = vmax.f32 %v5812, %v5813
  %v6123 = vmax.f32 %v5814, %v5815
  %v6124 = vmax.f32 %v5816, %v5817
  %v6125 = vmax.f32 %v5818, %v5819
  %v6126 = vmax.f32 %v5820, %v5821
  %v6127 = vmax.f32 %v5822, %v5823
  %v6128 = vmax.f32 %v5824, %v5825
  %v6129 = vmax.f32 %v5826, %v5827
  %v6130 = vmax.f32 %v5828, %v5829
  %v6131 = vmax.f32 %v5830, %v5831
  %v6132 = vmax.f32 %v5832, %v5833
  %v6133 = vmax.f32 %v5834, %v5835
  %v6134 = vmax.f32 %v5836, %v5837
  %v6135 = vmax.f32 %v5838, %v5839
  %v6136 = vmax.f32 %v5840, %v5841
  %v6137 = vmax.f32 %v5842, %v5843
  %v6138 = vmax.f32 %v5844, %v5845
  %v6139 = vmax.f32 %v5846, %v5847
  %v6140 = vmax.f32 %v5848, %v5849
  %v6141 = vmax.f32 %v5850, %v5851
  %v6142 = vmax.f32 %v5852, %v5853
  %v6143 = vmax.f32 %v5854, %v5855
  %v6144 = vmax.f32 %v5856, %v5868
  %v6145 = vmax.f32 %v5857, %v5869
  %v6146 = vmax.f32 %v5858, %v5870
  %v6147 = vmax.f32 %v5859, %v5871
  %v6148 = vmax.f32 %v5860, %v5872
  %v6149 = vmax.f32 %v5861, %v5873
  %v6150 = vmax.f32 %v5862, %v5874
  %v6151 = vmax.f32 %v5863, %v5875
  %v6152 = vmax.f32 %v5864, %v5876
  %v6153 = vmax.f32 %v5865, %v5877
  %v6154 = vmax.f32 %v5866, %v5878
  %v6155 = vmax.f32 %v5867, %v5879
  %v6156 = vmax.f32 %v5880, %v5892
  %v6157 = vmax.f32 %v5881, %v5893
  %v6158 = vmax.f32 %v5882, %v5894
  %v6159 = vmax.f32 %v5883, %v5895
  %v6160 = vmax.f32 %v5884, %v5896
  %v6161 = vmax.f32 %v5885, %v5897
  %v6162 = vmax.f32 %v5886, %v5898
  %v6163 = vmax.f32 %v5887, %v5899
  %v6164 = vmax.f32 %v5888, %v5900
  %v6165 = vmax.f32 %v5889, %v5901
  %v6166 = vmax.f32 %v5890, %v5902
  %v6167 = vmax.f32 %v5891, %v5903
  %v6168 = vmax.f32 %v5904, %v5916
  %v6169 = vmax.f32 %v5905, %v5917
  %v6170 = vmax.f32 %v5906, %v5918
  %v6171 = vmax.f32 %v5907, %v5919
  %v6172 = vmax.f32 %v5908, %v5920
  %v6173 = vmax.f32 %v5909, %v5921
  %v6174 = vmax.f32 %v5910, %v5922
  %v6175 = vmax.f32 %v5911, %v5923
  %v6176 = vmax.f32 %v5912, %v5924
  %v6177 = vmax.f32 %v5913, %v5925
  %v6178 = vmax.f32 %v5914, %v5926
  %v6179 = vmax.f32 %v5915, %v5927
  %v6180 = vmax.f32 %v5928, %v5940
  %v6181 = vmax.f32 %v5929, %v5941
  %v6182 = vmax.f32 %v5930, %v5942
  %v6183 = vmax.f32 %v5931, %v5943
  %v6184 = vmax.f32 %v5932, %v5944
  %v6185 = vmax.f32 %v5933, %v5945
  %v6186 = vmax.f32 %v5934, %v5946
  %v6187 = vmax.f32 %v5935, %v5947
  %v6188 = vmax.f32 %v5936, %v5948
  %v6189 = vmax.f32 %v5937, %v5949
  %v6190 = vmax.f32 %v5938, %v5950
  %v6191 = vmax.f32 %v5939, %v5951
  %v6192 = vmax.f32 %v5952, %v5964
  %v6193 = vmax.f32 %v5953, %v5965
  %v6194 = vmax.f32 %v5954, %v5966
  %v6195 = vmax.f32 %v5955, %v5967
  %v6196 = vmax.f32 %v5956, %v5968
  %v6197 = vmax.f32 %v5957, %v5969
  %v6198 = vmax.f32 %v5958, %v5970
  %v6199 = vmax.f32 %v5959, %v5971
  %v6200 = vmax.f32 %v5960, %v5972
  %v6201 = vmax.f32 %v5961, %v5973
  %v6202 = vmax.f32 %v5962, %v5974
  %v6203 = vmax.f32 %v5963, %v5975
  %v6204 = vmax.f32 %v5976, %v5988
  %v6205 = vmax.f32 %v5977, %v5989
  %v6206 = vmax.f32 %v5978, %v5990
  %v6207 = vmax.f32 %v5979, %v5991
  %v6208 = vmax.f32 %v5980, %v5992
  %v6209 = vmax.f32 %v5981, %v5993
  %v6210 = vmax.f32 %v5982, %v5994
  %v6211 = vmax.f32 %v5983, %v5995
  %v6212 = vmax.f32 %v5984, %v5996
  %v6213 = vmax.f32 %v5985, %v5997
  %v6214 = vmax.f32 %v5986, %v5998
  %v6215 = vmax.f32 %v5987, %v5999
  %v6216 = vmax.f32 %v6000, %v6012
  %v6217 = vmax.f32 %v6001, %v6013
  %v6218 = vmax.f32 %v6002, %v6014
  %v6219 = vmax.f32 %v6003, %v6015
  %v6220 = vmax.f32 %v6004, %v6016
  %v6221 = vmax.f32 %v6005, %v6017
  %v6222 = vmax.f32 %v6006, %v6018
  %v6223 = vmax.f32 %v6007, %v6019
  %v6224 = vmax.f32 %v6008, %v6020
  %v6225 = vmax.f32 %v6009, %v6021
  %v6226 = vmax.f32 %v6010, %v6022
  %v6227 = vmax.f32 %v6011, %v6023
  %v6228 = vmax.f32 %v6024, %v6036
  %v6229 = vmax.f32 %v6025, %v6037
  %v6230 = vmax.f32 %v6026, %v6038
  %v6231 = vmax.f32 %v6027, %v6039
  %v6232 = vmax.f32 %v6028, %v6040
  %v6233 = vmax.f32 %v6029, %v6041
  %v6234 = vmax.f32 %v6030, %v6042
  %v6235 = vmax.f32 %v6031, %v6043
  %v6236 = vmax.f32 %v6032, %v6044
  %v6237 = vmax.f32 %v6033, %v6045
  %v6238 = vmax.f32 %v6034, %v6046
  %v6239 = vmax.f32 %v6035, %v6047
  %v6240 = vmax.f32 %v6048, %v6060
  %v6241 = vmax.f32 %v6049, %v6061
  %v6242 = vmax.f32 %v6050, %v6062
  %v6243 = vmax.f32 %v6051, %v6063
  %v6244 = vmax.f32 %v6052, %v6064
  %v6245 = vmax.f32 %v6053, %v6065
  %v6246 = vmax.f32 %v6054, %v6066
  %v6247 = vmax.f32 %v6055, %v6067
  %v6248 = vmax.f32 %v6056, %v6068
  %v6249 = vmax.f32 %v6057, %v6069
  %v6250 = vmax.f32 %v6058, %v6070
  %v6251 = vmax.f32 %v6059, %v6071
  %v6252 = vmax.f32 %v6072, %v6084
  %v6253 = vmax.f32 %v6073, %v6085
  %v6254 = vmax.f32 %v6074, %v6086
  %v6255 = vmax.f32 %v6075, %v6087
  %v6256 = vmax.f32 %v6076, %v6088
  %v6257 = vmax.f32 %v6077, %v6089
  %v6258 = vmax.f32 %v6078, %v6090
  %v6259 = vmax.f32 %v6079, %v6091
  %v6260 = vmax.f32 %v6080, %v6092
  %v6261 = vmax.f32 %v6081, %v6093
  %v6262 = vmax.f32 %v6082, %v6094
  %v6263 = vmax.f32 %v6083, %v6095
  %v6264 = vmax.f32 %v6096, %v6108
  %v6265 = vmax.f32 %v6097, %v6109
  %v6266 = vmax.f32 %v6098, %v6110
  %v6267 = vmax.f32 %v6099, %v6111
  %v6268 = vmax.f32 %v6100, %v6112
  %v6269 = vmax.f32 %v6101, %v6113
  %v6270 = vmax.f32 %v6102, %v6114
  %v6271 = vmax.f32 %v6103, %v6115
  %v6272 = vmax.f32 %v6104, %v6116
  %v6273 = vmax.f32 %v6105, %v6117
  %v6274 = vmax.f32 %v6106, %v6118
  %v6275 = vmax.f32 %v6107, %v6119
  %v6276 = vmax.f32 %v6120, %v6132
  %v6277 = vmax.f32 %v6121, %v6133
  %v6278 = vmax.f32 %v6122, %v6134
  %v6279 = vmax.f32 %v6123, %v6135
  %v6280 = vmax.f32 %v6124, %v6136
  %v6281 = vmax.f32 %v6125, %v6137
  %v6282 = vmax.f32 %v6126, %v6138
  %v6283 = vmax.f32 %v6127, %v6139
  %v6284 = vmax.f32 %v6128, %v6140
  %v6285 = vmax.f32 %v6129, %v6141
  %v6286 = vmax.f32 %v6130, %v6142
  %v6287 = vmax.f32 %v6131, %v6143
  %v6288 = vpack.c.bf16 %v6144, %v6144
  %v6289 = vpack.c.bf16 %v6145, %v6145
  %v6290 = vpack.c.bf16 %v6146, %v6146
  %v6291 = vpack.c.bf16 %v6147, %v6147
  %v6292 = vpack.c.bf16 %v6148, %v6148
  %v6293 = vpack.c.bf16 %v6149, %v6149
  %v6294 = vpack.c.bf16 %v6150, %v6150
  %v6295 = vpack.c.bf16 %v6151, %v6151
  %v6296 = vpack.c.bf16 %v6152, %v6152
  %v6297 = vpack.c.bf16 %v6153, %v6153
  %v6298 = vpack.c.bf16 %v6154, %v6154
  %v6299 = vpack.c.bf16 %v6155, %v6155
  %v6300 = vpack.c.bf16 %v6156, %v6156
  %v6301 = vpack.c.bf16 %v6157, %v6157
  %v6302 = vpack.c.bf16 %v6158, %v6158
  %v6303 = vpack.c.bf16 %v6159, %v6159
  %v6304 = vpack.c.bf16 %v6160, %v6160
  %v6305 = vpack.c.bf16 %v6161, %v6161
  %v6306 = vpack.c.bf16 %v6162, %v6162
  %v6307 = vpack.c.bf16 %v6163, %v6163
  %v6308 = vpack.c.bf16 %v6164, %v6164
  %v6309 = vpack.c.bf16 %v6165, %v6165
  %v6310 = vpack.c.bf16 %v6166, %v6166
  %v6311 = vpack.c.bf16 %v6167, %v6167
  %v6312 = vpack.c.bf16 %v6168, %v6168
  %v6313 = vpack.c.bf16 %v6169, %v6169
  %v6314 = vpack.c.bf16 %v6170, %v6170
  %v6315 = vpack.c.bf16 %v6171, %v6171
  %v6316 = vpack.c.bf16 %v6172, %v6172
  %v6317 = vpack.c.bf16 %v6173, %v6173
  %v6318 = vpack.c.bf16 %v6174, %v6174
  %v6319 = vpack.c.bf16 %v6175, %v6175
  %v6320 = vpack.c.bf16 %v6176, %v6176
  %v6321 = vpack.c.bf16 %v6177, %v6177
  %v6322 = vpack.c.bf16 %v6178, %v6178
  %v6323 = vpack.c.bf16 %v6179, %v6179
  %v6324 = vpack.c.bf16 %v6180, %v6180
  %v6325 = vpack.c.bf16 %v6181, %v6181
  %v6326 = vpack.c.bf16 %v6182, %v6182
  %v6327 = vpack.c.bf16 %v6183, %v6183
  %v6328 = vpack.c.bf16 %v6184, %v6184
  %v6329 = vpack.c.bf16 %v6185, %v6185
  %v6330 = vpack.c.bf16 %v6186, %v6186
  %v6331 = vpack.c.bf16 %v6187, %v6187
  %v6332 = vpack.c.bf16 %v6188, %v6188
  %v6333 = vpack.c.bf16 %v6189, %v6189
  %v6334 = vpack.c.bf16 %v6190, %v6190
  %v6335 = vpack.c.bf16 %v6191, %v6191
  %v6336 = vpack.c.bf16 %v6192, %v6192
  %v6337 = vpack.c.bf16 %v6193, %v6193
  %v6338 = vpack.c.bf16 %v6194, %v6194
  %v6339 = vpack.c.bf16 %v6195, %v6195
  %v6340 = vpack.c.bf16 %v6196, %v6196
  %v6341 = vpack.c.bf16 %v6197, %v6197
  %v6342 = vpack.c.bf16 %v6198, %v6198
  %v6343 = vpack.c.bf16 %v6199, %v6199
  %v6344 = vpack.c.bf16 %v6200, %v6200
  %v6345 = vpack.c.bf16 %v6201, %v6201
  %v6346 = vpack.c.bf16 %v6202, %v6202
  %v6347 = vpack.c.bf16 %v6203, %v6203
  %v6348 = vpack.c.bf16 %v6204, %v6204
  %v6349 = vpack.c.bf16 %v6205, %v6205
  %v6350 = vpack.c.bf16 %v6206, %v6206
  %v6351 = vpack.c.bf16 %v6207, %v6207
  %v6352 = vpack.c.bf16 %v6208, %v6208
  %v6353 = vpack.c.bf16 %v6209, %v6209
  %v6354 = vpack.c.bf16 %v6210, %v6210
  %v6355 = vpack.c.bf16 %v6211, %v6211
  %v6356 = vpack.c.bf16 %v6212, %v6212
  %v6357 = vpack.c.bf16 %v6213, %v6213
  %v6358 = vpack.c.bf16 %v6214, %v6214
  %v6359 = vpack.c.bf16 %v6215, %v6215
  %v6360 = vpack.c.bf16 %v6216, %v6216
  %v6361 = vpack.c.bf16 %v6217, %v6217
  %v6362 = vpack.c.bf16 %v6218, %v6218
  %v6363 = vpack.c.bf16 %v6219, %v6219
  %v6364 = vpack.c.bf16 %v6220, %v6220
  %v6365 = vpack.c.bf16 %v6221, %v6221
  %v6366 = vpack.c.bf16 %v6222, %v6222
  %v6367 = vpack.c.bf16 %v6223, %v6223
  %v6368 = vpack.c.bf16 %v6224, %v6224
  %v6369 = vpack.c.bf16 %v6225, %v6225
  %v6370 = vpack.c.bf16 %v6226, %v6226
  %v6371 = vpack.c.bf16 %v6227, %v6227
  %v6372 = vpack.c.bf16 %v6228, %v6228
  %v6373 = vpack.c.bf16 %v6229, %v6229
  %v6374 = vpack.c.bf16 %v6230, %v6230
  %v6375 = vpack.c.bf16 %v6231, %v6231
  %v6376 = vpack.c.bf16 %v6232, %v6232
  %v6377 = vpack.c.bf16 %v6233, %v6233
  %v6378 = vpack.c.bf16 %v6234, %v6234
  %v6379 = vpack.c.bf16 %v6235, %v6235
  %v6380 = vpack.c.bf16 %v6236, %v6236
  %v6381 = vpack.c.bf16 %v6237, %v6237
  %v6382 = vpack.c.bf16 %v6238, %v6238
  %v6383 = vpack.c.bf16 %v6239, %v6239
  %v6384 = vpack.c.bf16 %v6240, %v6240
  %v6385 = vpack.c.bf16 %v6241, %v6241
  %v6386 = vpack.c.bf16 %v6242, %v6242
  %v6387 = vpack.c.bf16 %v6243, %v6243
  %v6388 = vpack.c.bf16 %v6244, %v6244
  %v6389 = vpack.c.bf16 %v6245, %v6245
  %v6390 = vpack.c.bf16 %v6246, %v6246
  %v6391 = vpack.c.bf16 %v6247, %v6247
  %v6392 = vpack.c.bf16 %v6248, %v6248
  %v6393 = vpack.c.bf16 %v6249, %v6249
  %v6394 = vpack.c.bf16 %v6250, %v6250
  %v6395 = vpack.c.bf16 %v6251, %v6251
  %v6396 = vpack.c.bf16 %v6252, %v6252
  %v6397 = vpack.c.bf16 %v6253, %v6253
  %v6398 = vpack.c.bf16 %v6254, %v6254
  %v6399 = vpack.c.bf16 %v6255, %v6255
  %v6400 = vpack.c.bf16 %v6256, %v6256
  %v6401 = vpack.c.bf16 %v6257, %v6257
  %v6402 = vpack.c.bf16 %v6258, %v6258
  %v6403 = vpack.c.bf16 %v6259, %v6259
  %v6404 = vpack.c.bf16 %v6260, %v6260
  %v6405 = vpack.c.bf16 %v6261, %v6261
  %v6406 = vpack.c.bf16 %v6262, %v6262
  %v6407 = vpack.c.bf16 %v6263, %v6263
  %v6408 = vpack.c.bf16 %v6264, %v6264
  %v6409 = vpack.c.bf16 %v6265, %v6265
  %v6410 = vpack.c.bf16 %v6266, %v6266
  %v6411 = vpack.c.bf16 %v6267, %v6267
  %v6412 = vpack.c.bf16 %v6268, %v6268
  %v6413 = vpack.c.bf16 %v6269, %v6269
  %v6414 = vpack.c.bf16 %v6270, %v6270
  %v6415 = vpack.c.bf16 %v6271, %v6271
  %v6416 = vpack.c.bf16 %v6272, %v6272
  %v6417 = vpack.c.bf16 %v6273, %v6273
  %v6418 = vpack.c.bf16 %v6274, %v6274
  %v6419 = vpack.c.bf16 %v6275, %v6275
  %v6420 = vpack.c.bf16 %v6276, %v6276
  %v6421 = vpack.c.bf16 %v6277, %v6277
  %v6422 = vpack.c.bf16 %v6278, %v6278
  %v6423 = vpack.c.bf16 %v6279, %v6279
  %v6424 = vpack.c.bf16 %v6280, %v6280
  %v6425 = vpack.c.bf16 %v6281, %v6281
  %v6426 = vpack.c.bf16 %v6282, %v6282
  %v6427 = vpack.c.bf16 %v6283, %v6283
  %v6428 = vpack.c.bf16 %v6284, %v6284
  %v6429 = vpack.c.bf16 %v6285, %v6285
  %v6430 = vpack.c.bf16 %v6286, %v6286
  %v6431 = vpack.c.bf16 %v6287, %v6287
  %6496 = vrot.lane.b32.xlu0 %v6289, 20
  %v6497 = vpop.permute.xlu0 %6496
  %6498 = vrot.lane.b32.xlu0 %v6290, 20
  %v6499 = vpop.permute.xlu0 %6498
  %6500 = vrot.lane.b32.xlu0 %v6291, 20
  %v6501 = vpop.permute.xlu0 %6500
  %6502 = vrot.lane.b32.xlu0 %v6292, 20
  %v6503 = vpop.permute.xlu0 %6502
  %6504 = vrot.lane.b32.xlu0 %v6293, 20
  %v6505 = vpop.permute.xlu0 %6504
  %6506 = vrot.lane.b32.xlu0 %v6294, 20
  %v6507 = vpop.permute.xlu0 %6506
  %6508 = vrot.lane.b32.xlu0 %v6295, 20
  %v6509 = vpop.permute.xlu0 %6508
  %6510 = vrot.lane.b32.xlu0 %v6296, 20
  %v6511 = vpop.permute.xlu0 %6510
  %6512 = vrot.lane.b32.xlu0 %v6301, 20
  %v6513 = vpop.permute.xlu0 %6512
  %6514 = vrot.lane.b32.xlu0 %v6302, 20
  %v6515 = vpop.permute.xlu0 %6514
  %6516 = vrot.lane.b32.xlu0 %v6303, 20
  %v6517 = vpop.permute.xlu0 %6516
  %6518 = vrot.lane.b32.xlu0 %v6304, 20
  %v6519 = vpop.permute.xlu0 %6518
  %6520 = vrot.lane.b32.xlu0 %v6305, 20
  %v6521 = vpop.permute.xlu0 %6520
  %6522 = vrot.lane.b32.xlu0 %v6306, 20
  %v6523 = vpop.permute.xlu0 %6522
  %6524 = vrot.lane.b32.xlu0 %v6307, 20
  %v6525 = vpop.permute.xlu0 %6524
  %6526 = vrot.lane.b32.xlu0 %v6308, 20
  %v6527 = vpop.permute.xlu0 %6526
  %6528 = vrot.lane.b32.xlu0 %v6313, 20
  %v6529 = vpop.permute.xlu0 %6528
  %6530 = vrot.lane.b32.xlu0 %v6314, 20
  %v6531 = vpop.permute.xlu0 %6530
  %6532 = vrot.lane.b32.xlu0 %v6315, 20
  %v6533 = vpop.permute.xlu0 %6532
  %6534 = vrot.lane.b32.xlu0 %v6316, 20
  %v6535 = vpop.permute.xlu0 %6534
  %6536 = vrot.lane.b32.xlu0 %v6317, 20
  %v6537 = vpop.permute.xlu0 %6536
  %6538 = vrot.lane.b32.xlu0 %v6318, 20
  %v6539 = vpop.permute.xlu0 %6538
  %6540 = vrot.lane.b32.xlu0 %v6319, 20
  %v6541 = vpop.permute.xlu0 %6540
  %6542 = vrot.lane.b32.xlu0 %v6320, 20
  %v6543 = vpop.permute.xlu0 %6542
  %6544 = vrot.lane.b32.xlu0 %v6325, 20
  %v6545 = vpop.permute.xlu0 %6544
  %6546 = vrot.lane.b32.xlu0 %v6326, 20
  %v6547 = vpop.permute.xlu0 %6546
  %6548 = vrot.lane.b32.xlu0 %v6327, 20
  %v6549 = vpop.permute.xlu0 %6548
  %6550 = vrot.lane.b32.xlu0 %v6328, 20
  %v6551 = vpop.permute.xlu0 %6550
  %6552 = vrot.lane.b32.xlu0 %v6329, 20
  %v6553 = vpop.permute.xlu0 %6552
  %6554 = vrot.lane.b32.xlu0 %v6330, 20
  %v6555 = vpop.permute.xlu0 %6554
  %6556 = vrot.lane.b32.xlu0 %v6331, 20
  %v6557 = vpop.permute.xlu0 %6556
  %6558 = vrot.lane.b32.xlu0 %v6332, 20
  %v6559 = vpop.permute.xlu0 %6558
  %6560 = vrot.lane.b32.xlu0 %v6337, 20
  %v6561 = vpop.permute.xlu0 %6560
  %6562 = vrot.lane.b32.xlu0 %v6338, 20
  %v6563 = vpop.permute.xlu0 %6562
  %6564 = vrot.lane.b32.xlu0 %v6339, 20
  %v6565 = vpop.permute.xlu0 %6564
  %6566 = vrot.lane.b32.xlu0 %v6340, 20
  %v6567 = vpop.permute.xlu0 %6566
  %6568 = vrot.lane.b32.xlu0 %v6341, 20
  %v6569 = vpop.permute.xlu0 %6568
  %6570 = vrot.lane.b32.xlu0 %v6342, 20
  %v6571 = vpop.permute.xlu0 %6570
  %6572 = vrot.lane.b32.xlu0 %v6343, 20
  %v6573 = vpop.permute.xlu0 %6572
  %6574 = vrot.lane.b32.xlu0 %v6344, 20
  %v6575 = vpop.permute.xlu0 %6574
  %6576 = vrot.lane.b32.xlu0 %v6349, 20
  %v6577 = vpop.permute.xlu0 %6576
  %6578 = vrot.lane.b32.xlu0 %v6350, 20
  %v6579 = vpop.permute.xlu0 %6578
  %6580 = vrot.lane.b32.xlu0 %v6351, 20
  %v6581 = vpop.permute.xlu0 %6580
  %6582 = vrot.lane.b32.xlu0 %v6352, 20
  %v6583 = vpop.permute.xlu0 %6582
  %6584 = vrot.lane.b32.xlu0 %v6353, 20
  %v6585 = vpop.permute.xlu0 %6584
  %6586 = vrot.lane.b32.xlu0 %v6354, 20
  %v6587 = vpop.permute.xlu0 %6586
  %6588 = vrot.lane.b32.xlu0 %v6355, 20
  %v6589 = vpop.permute.xlu0 %6588
  %6590 = vrot.lane.b32.xlu0 %v6356, 20
  %v6591 = vpop.permute.xlu0 %6590
  %6592 = vrot.lane.b32.xlu0 %v6361, 20
  %v6593 = vpop.permute.xlu0 %6592
  %6594 = vrot.lane.b32.xlu0 %v6362, 20
  %v6595 = vpop.permute.xlu0 %6594
  %6596 = vrot.lane.b32.xlu0 %v6363, 20
  %v6597 = vpop.permute.xlu0 %6596
  %6598 = vrot.lane.b32.xlu0 %v6364, 20
  %v6599 = vpop.permute.xlu0 %6598
  %6600 = vrot.lane.b32.xlu0 %v6365, 20
  %v6601 = vpop.permute.xlu0 %6600
  %6602 = vrot.lane.b32.xlu0 %v6366, 20
  %v6603 = vpop.permute.xlu0 %6602
  %6604 = vrot.lane.b32.xlu0 %v6367, 20
  %v6605 = vpop.permute.xlu0 %6604
  %6606 = vrot.lane.b32.xlu0 %v6368, 20
  %v6607 = vpop.permute.xlu0 %6606
  %6608 = vrot.lane.b32.xlu0 %v6373, 20
  %v6609 = vpop.permute.xlu0 %6608
  %6610 = vrot.lane.b32.xlu0 %v6374, 20
  %v6611 = vpop.permute.xlu0 %6610
  %6612 = vrot.lane.b32.xlu0 %v6375, 20
  %v6613 = vpop.permute.xlu0 %6612
  %6614 = vrot.lane.b32.xlu0 %v6376, 20
  %v6615 = vpop.permute.xlu0 %6614
  %6616 = vrot.lane.b32.xlu0 %v6377, 20
  %v6617 = vpop.permute.xlu0 %6616
  %6618 = vrot.lane.b32.xlu0 %v6378, 20
  %v6619 = vpop.permute.xlu0 %6618
  %6620 = vrot.lane.b32.xlu0 %v6379, 20
  %v6621 = vpop.permute.xlu0 %6620
  %6622 = vrot.lane.b32.xlu0 %v6380, 20
  %v6623 = vpop.permute.xlu0 %6622
  %6632 = vrot.lane.b32.xlu0 %v6290, 40
  %v6633 = vpop.permute.xlu0 %6632
  %6634 = vrot.lane.b32.xlu0 %v6291, 40
  %v6635 = vpop.permute.xlu0 %6634
  %6636 = vrot.lane.b32.xlu0 %v6292, 40
  %v6637 = vpop.permute.xlu0 %6636
  %6638 = vrot.lane.b32.xlu0 %v6293, 40
  %v6639 = vpop.permute.xlu0 %6638
  %6640 = vrot.lane.b32.xlu0 %v6294, 40
  %v6641 = vpop.permute.xlu0 %6640
  %6642 = vrot.lane.b32.xlu0 %v6295, 40
  %v6643 = vpop.permute.xlu0 %6642
  %6644 = vrot.lane.b32.xlu0 %v6296, 40
  %v6645 = vpop.permute.xlu0 %6644
  %6646 = vrot.lane.b32.xlu0 %v6297, 40
  %v6647 = vpop.permute.xlu0 %6646
  %6648 = vrot.lane.b32.xlu0 %v6302, 40
  %v6649 = vpop.permute.xlu0 %6648
  %6650 = vrot.lane.b32.xlu0 %v6303, 40
  %v6651 = vpop.permute.xlu0 %6650
  %6652 = vrot.lane.b32.xlu0 %v6304, 40
  %v6653 = vpop.permute.xlu0 %6652
  %6654 = vrot.lane.b32.xlu0 %v6305, 40
  %v6655 = vpop.permute.xlu0 %6654
  %6656 = vrot.lane.b32.xlu0 %v6306, 40
  %v6657 = vpop.permute.xlu0 %6656
  %6658 = vrot.lane.b32.xlu0 %v6307, 40
  %v6659 = vpop.permute.xlu0 %6658
  %6660 = vrot.lane.b32.xlu0 %v6308, 40
  %v6661 = vpop.permute.xlu0 %6660
  %6662 = vrot.lane.b32.xlu0 %v6309, 40
  %v6663 = vpop.permute.xlu0 %6662
  %6664 = vrot.lane.b32.xlu0 %v6314, 40
  %v6665 = vpop.permute.xlu0 %6664
  %6666 = vrot.lane.b32.xlu0 %v6315, 40
  %v6667 = vpop.permute.xlu0 %6666
  %6668 = vrot.lane.b32.xlu0 %v6316, 40
  %v6669 = vpop.permute.xlu0 %6668
  %6670 = vrot.lane.b32.xlu0 %v6317, 40
  %v6671 = vpop.permute.xlu0 %6670
  %6672 = vrot.lane.b32.xlu0 %v6318, 40
  %v6673 = vpop.permute.xlu0 %6672
  %6674 = vrot.lane.b32.xlu0 %v6319, 40
  %v6675 = vpop.permute.xlu0 %6674
  %6676 = vrot.lane.b32.xlu0 %v6320, 40
  %v6677 = vpop.permute.xlu0 %6676
  %6678 = vrot.lane.b32.xlu0 %v6321, 40
  %v6679 = vpop.permute.xlu0 %6678
  %6680 = vrot.lane.b32.xlu0 %v6326, 40
  %v6681 = vpop.permute.xlu0 %6680
  %6682 = vrot.lane.b32.xlu0 %v6327, 40
  %v6683 = vpop.permute.xlu0 %6682
  %6684 = vrot.lane.b32.xlu0 %v6328, 40
  %v6685 = vpop.permute.xlu0 %6684
  %6686 = vrot.lane.b32.xlu0 %v6329, 40
  %v6687 = vpop.permute.xlu0 %6686
  %6688 = vrot.lane.b32.xlu0 %v6330, 40
  %v6689 = vpop.permute.xlu0 %6688
  %6690 = vrot.lane.b32.xlu0 %v6331, 40
  %v6691 = vpop.permute.xlu0 %6690
  %6692 = vrot.lane.b32.xlu0 %v6332, 40
  %v6693 = vpop.permute.xlu0 %6692
  %6694 = vrot.lane.b32.xlu0 %v6333, 40
  %v6695 = vpop.permute.xlu0 %6694
  %6696 = vrot.lane.b32.xlu0 %v6338, 40
  %v6697 = vpop.permute.xlu0 %6696
  %6698 = vrot.lane.b32.xlu0 %v6339, 40
  %v6699 = vpop.permute.xlu0 %6698
  %6700 = vrot.lane.b32.xlu0 %v6340, 40
  %v6701 = vpop.permute.xlu0 %6700
  %6702 = vrot.lane.b32.xlu0 %v6341, 40
  %v6703 = vpop.permute.xlu0 %6702
  %6704 = vrot.lane.b32.xlu0 %v6342, 40
  %v6705 = vpop.permute.xlu0 %6704
  %6706 = vrot.lane.b32.xlu0 %v6343, 40
  %v6707 = vpop.permute.xlu0 %6706
  %6708 = vrot.lane.b32.xlu0 %v6344, 40
  %v6709 = vpop.permute.xlu0 %6708
  %6710 = vrot.lane.b32.xlu0 %v6345, 40
  %v6711 = vpop.permute.xlu0 %6710
  %6712 = vrot.lane.b32.xlu0 %v6350, 40
  %v6713 = vpop.permute.xlu0 %6712
  %6714 = vrot.lane.b32.xlu0 %v6351, 40
  %v6715 = vpop.permute.xlu0 %6714
  %6716 = vrot.lane.b32.xlu0 %v6352, 40
  %v6717 = vpop.permute.xlu0 %6716
  %6718 = vrot.lane.b32.xlu0 %v6353, 40
  %v6719 = vpop.permute.xlu0 %6718
  %6720 = vrot.lane.b32.xlu0 %v6354, 40
  %v6721 = vpop.permute.xlu0 %6720
  %6722 = vrot.lane.b32.xlu0 %v6355, 40
  %v6723 = vpop.permute.xlu0 %6722
  %6724 = vrot.lane.b32.xlu0 %v6356, 40
  %v6725 = vpop.permute.xlu0 %6724
  %6726 = vrot.lane.b32.xlu0 %v6357, 40
  %v6727 = vpop.permute.xlu0 %6726
  %6728 = vrot.lane.b32.xlu0 %v6362, 40
  %v6729 = vpop.permute.xlu0 %6728
  %6730 = vrot.lane.b32.xlu0 %v6363, 40
  %v6731 = vpop.permute.xlu0 %6730
  %6732 = vrot.lane.b32.xlu0 %v6364, 40
  %v6733 = vpop.permute.xlu0 %6732
  %6734 = vrot.lane.b32.xlu0 %v6365, 40
  %v6735 = vpop.permute.xlu0 %6734
  %6736 = vrot.lane.b32.xlu0 %v6366, 40
  %v6737 = vpop.permute.xlu0 %6736
  %6738 = vrot.lane.b32.xlu0 %v6367, 40
  %v6739 = vpop.permute.xlu0 %6738
  %6740 = vrot.lane.b32.xlu0 %v6368, 40
  %v6741 = vpop.permute.xlu0 %6740
  %6742 = vrot.lane.b32.xlu0 %v6369, 40
  %v6743 = vpop.permute.xlu0 %6742
  %6744 = vrot.lane.b32.xlu0 %v6374, 40
  %v6745 = vpop.permute.xlu0 %6744
  %6746 = vrot.lane.b32.xlu0 %v6375, 40
  %v6747 = vpop.permute.xlu0 %6746
  %6748 = vrot.lane.b32.xlu0 %v6376, 40
  %v6749 = vpop.permute.xlu0 %6748
  %6750 = vrot.lane.b32.xlu0 %v6377, 40
  %v6751 = vpop.permute.xlu0 %6750
  %6752 = vrot.lane.b32.xlu0 %v6378, 40
  %v6753 = vpop.permute.xlu0 %6752
  %6754 = vrot.lane.b32.xlu0 %v6379, 40
  %v6755 = vpop.permute.xlu0 %6754
  %6756 = vrot.lane.b32.xlu0 %v6380, 40
  %v6757 = vpop.permute.xlu0 %6756
  %6758 = vrot.lane.b32.xlu0 %v6381, 40
  %v6759 = vpop.permute.xlu0 %6758
  %6768 = vrot.lane.b32.xlu0 %v6291, 60
  %v6769 = vpop.permute.xlu0 %6768
  %6770 = vrot.lane.b32.xlu0 %v6292, 60
  %v6771 = vpop.permute.xlu0 %6770
  %6772 = vrot.lane.b32.xlu0 %v6293, 60
  %v6773 = vpop.permute.xlu0 %6772
  %6774 = vrot.lane.b32.xlu0 %v6294, 60
  %v6775 = vpop.permute.xlu0 %6774
  %6776 = vrot.lane.b32.xlu0 %v6295, 60
  %v6777 = vpop.permute.xlu0 %6776
  %6778 = vrot.lane.b32.xlu0 %v6296, 60
  %v6779 = vpop.permute.xlu0 %6778
  %6780 = vrot.lane.b32.xlu0 %v6297, 60
  %v6781 = vpop.permute.xlu0 %6780
  %6782 = vrot.lane.b32.xlu0 %v6298, 60
  %v6783 = vpop.permute.xlu0 %6782
  %6784 = vrot.lane.b32.xlu0 %v6303, 60
  %v6785 = vpop.permute.xlu0 %6784
  %6786 = vrot.lane.b32.xlu0 %v6304, 60
  %v6787 = vpop.permute.xlu0 %6786
  %6788 = vrot.lane.b32.xlu0 %v6305, 60
  %v6789 = vpop.permute.xlu0 %6788
  %6790 = vrot.lane.b32.xlu0 %v6306, 60
  %v6791 = vpop.permute.xlu0 %6790
  %6792 = vrot.lane.b32.xlu0 %v6307, 60
  %v6793 = vpop.permute.xlu0 %6792
  %6794 = vrot.lane.b32.xlu0 %v6308, 60
  %v6795 = vpop.permute.xlu0 %6794
  %6796 = vrot.lane.b32.xlu0 %v6309, 60
  %v6797 = vpop.permute.xlu0 %6796
  %6798 = vrot.lane.b32.xlu0 %v6310, 60
  %v6799 = vpop.permute.xlu0 %6798
  %6800 = vrot.lane.b32.xlu0 %v6315, 60
  %v6801 = vpop.permute.xlu0 %6800
  %6802 = vrot.lane.b32.xlu0 %v6316, 60
  %v6803 = vpop.permute.xlu0 %6802
  %6804 = vrot.lane.b32.xlu0 %v6317, 60
  %v6805 = vpop.permute.xlu0 %6804
  %6806 = vrot.lane.b32.xlu0 %v6318, 60
  %v6807 = vpop.permute.xlu0 %6806
  %6808 = vrot.lane.b32.xlu0 %v6319, 60
  %v6809 = vpop.permute.xlu0 %6808
  %6810 = vrot.lane.b32.xlu0 %v6320, 60
  %v6811 = vpop.permute.xlu0 %6810
  %6812 = vrot.lane.b32.xlu0 %v6321, 60
  %v6813 = vpop.permute.xlu0 %6812
  %6814 = vrot.lane.b32.xlu0 %v6322, 60
  %v6815 = vpop.permute.xlu0 %6814
  %6816 = vrot.lane.b32.xlu0 %v6327, 60
  %v6817 = vpop.permute.xlu0 %6816
  %6818 = vrot.lane.b32.xlu0 %v6328, 60
  %v6819 = vpop.permute.xlu0 %6818
  %6820 = vrot.lane.b32.xlu0 %v6329, 60
  %v6821 = vpop.permute.xlu0 %6820
  %6822 = vrot.lane.b32.xlu0 %v6330, 60
  %v6823 = vpop.permute.xlu0 %6822
  %6824 = vrot.lane.b32.xlu0 %v6331, 60
  %v6825 = vpop.permute.xlu0 %6824
  %6826 = vrot.lane.b32.xlu0 %v6332, 60
  %v6827 = vpop.permute.xlu0 %6826
  %6828 = vrot.lane.b32.xlu0 %v6333, 60
  %v6829 = vpop.permute.xlu0 %6828
  %6830 = vrot.lane.b32.xlu0 %v6334, 60
  %v6831 = vpop.permute.xlu0 %6830
  %6832 = vrot.lane.b32.xlu0 %v6339, 60
  %v6833 = vpop.permute.xlu0 %6832
  %6834 = vrot.lane.b32.xlu0 %v6340, 60
  %v6835 = vpop.permute.xlu0 %6834
  %6836 = vrot.lane.b32.xlu0 %v6341, 60
  %v6837 = vpop.permute.xlu0 %6836
  %6838 = vrot.lane.b32.xlu0 %v6342, 60
  %v6839 = vpop.permute.xlu0 %6838
  %6840 = vrot.lane.b32.xlu0 %v6343, 60
  %v6841 = vpop.permute.xlu0 %6840
  %6842 = vrot.lane.b32.xlu0 %v6344, 60
  %v6843 = vpop.permute.xlu0 %6842
  %6844 = vrot.lane.b32.xlu0 %v6345, 60
  %v6845 = vpop.permute.xlu0 %6844
  %6846 = vrot.lane.b32.xlu0 %v6346, 60
  %v6847 = vpop.permute.xlu0 %6846
  %6848 = vrot.lane.b32.xlu0 %v6351, 60
  %v6849 = vpop.permute.xlu0 %6848
  %6850 = vrot.lane.b32.xlu0 %v6352, 60
  %v6851 = vpop.permute.xlu0 %6850
  %6852 = vrot.lane.b32.xlu0 %v6353, 60
  %v6853 = vpop.permute.xlu0 %6852
  %6854 = vrot.lane.b32.xlu0 %v6354, 60
  %v6855 = vpop.permute.xlu0 %6854
  %6856 = vrot.lane.b32.xlu0 %v6355, 60
  %v6857 = vpop.permute.xlu0 %6856
  %6858 = vrot.lane.b32.xlu0 %v6356, 60
  %v6859 = vpop.permute.xlu0 %6858
  %6860 = vrot.lane.b32.xlu0 %v6357, 60
  %v6861 = vpop.permute.xlu0 %6860
  %6862 = vrot.lane.b32.xlu0 %v6358, 60
  %v6863 = vpop.permute.xlu0 %6862
  %6864 = vrot.lane.b32.xlu0 %v6363, 60
  %v6865 = vpop.permute.xlu0 %6864
  %6866 = vrot.lane.b32.xlu0 %v6364, 60
  %v6867 = vpop.permute.xlu0 %6866
  %6868 = vrot.lane.b32.xlu0 %v6365, 60
  %v6869 = vpop.permute.xlu0 %6868
  %6870 = vrot.lane.b32.xlu0 %v6366, 60
  %v6871 = vpop.permute.xlu0 %6870
  %6872 = vrot.lane.b32.xlu0 %v6367, 60
  %v6873 = vpop.permute.xlu0 %6872
  %6874 = vrot.lane.b32.xlu0 %v6368, 60
  %v6875 = vpop.permute.xlu0 %6874
  %6876 = vrot.lane.b32.xlu0 %v6369, 60
  %v6877 = vpop.permute.xlu0 %6876
  %6878 = vrot.lane.b32.xlu0 %v6370, 60
  %v6879 = vpop.permute.xlu0 %6878
  %6880 = vrot.lane.b32.xlu0 %v6375, 60
  %v6881 = vpop.permute.xlu0 %6880
  %6882 = vrot.lane.b32.xlu0 %v6376, 60
  %v6883 = vpop.permute.xlu0 %6882
  %6884 = vrot.lane.b32.xlu0 %v6377, 60
  %v6885 = vpop.permute.xlu0 %6884
  %6886 = vrot.lane.b32.xlu0 %v6378, 60
  %v6887 = vpop.permute.xlu0 %6886
  %6888 = vrot.lane.b32.xlu0 %v6379, 60
  %v6889 = vpop.permute.xlu0 %6888
  %6890 = vrot.lane.b32.xlu0 %v6380, 60
  %v6891 = vpop.permute.xlu0 %6890
  %6892 = vrot.lane.b32.xlu0 %v6381, 60
  %v6893 = vpop.permute.xlu0 %6892
  %6894 = vrot.lane.b32.xlu0 %v6382, 60
  %v6895 = vpop.permute.xlu0 %6894
  %6904 = vrot.lane.b32.xlu0 %v6292, 80
  %v6905 = vpop.permute.xlu0 %6904
  %6906 = vrot.lane.b32.xlu0 %v6293, 80
  %v6907 = vpop.permute.xlu0 %6906
  %6908 = vrot.lane.b32.xlu0 %v6294, 80
  %v6909 = vpop.permute.xlu0 %6908
  %6910 = vrot.lane.b32.xlu0 %v6295, 80
  %v6911 = vpop.permute.xlu0 %6910
  %6912 = vrot.lane.b32.xlu0 %v6296, 80
  %v6913 = vpop.permute.xlu0 %6912
  %6914 = vrot.lane.b32.xlu0 %v6297, 80
  %v6915 = vpop.permute.xlu0 %6914
  %6916 = vrot.lane.b32.xlu0 %v6298, 80
  %v6917 = vpop.permute.xlu0 %6916
  %6918 = vrot.lane.b32.xlu0 %v6299, 80
  %v6919 = vpop.permute.xlu0 %6918
  %6920 = vrot.lane.b32.xlu0 %v6304, 80
  %v6921 = vpop.permute.xlu0 %6920
  %6922 = vrot.lane.b32.xlu0 %v6305, 80
  %v6923 = vpop.permute.xlu0 %6922
  %6924 = vrot.lane.b32.xlu0 %v6306, 80
  %v6925 = vpop.permute.xlu0 %6924
  %6926 = vrot.lane.b32.xlu0 %v6307, 80
  %v6927 = vpop.permute.xlu0 %6926
  %6928 = vrot.lane.b32.xlu0 %v6308, 80
  %v6929 = vpop.permute.xlu0 %6928
  %6930 = vrot.lane.b32.xlu0 %v6309, 80
  %v6931 = vpop.permute.xlu0 %6930
  %6932 = vrot.lane.b32.xlu0 %v6310, 80
  %v6933 = vpop.permute.xlu0 %6932
  %6934 = vrot.lane.b32.xlu0 %v6311, 80
  %v6935 = vpop.permute.xlu0 %6934
  %6936 = vrot.lane.b32.xlu0 %v6316, 80
  %v6937 = vpop.permute.xlu0 %6936
  %6938 = vrot.lane.b32.xlu0 %v6317, 80
  %v6939 = vpop.permute.xlu0 %6938
  %6940 = vrot.lane.b32.xlu0 %v6318, 80
  %v6941 = vpop.permute.xlu0 %6940
  %6942 = vrot.lane.b32.xlu0 %v6319, 80
  %v6943 = vpop.permute.xlu0 %6942
  %6944 = vrot.lane.b32.xlu0 %v6320, 80
  %v6945 = vpop.permute.xlu0 %6944
  %6946 = vrot.lane.b32.xlu0 %v6321, 80
  %v6947 = vpop.permute.xlu0 %6946
  %6948 = vrot.lane.b32.xlu0 %v6322, 80
  %v6949 = vpop.permute.xlu0 %6948
  %6950 = vrot.lane.b32.xlu0 %v6323, 80
  %v6951 = vpop.permute.xlu0 %6950
  %6952 = vrot.lane.b32.xlu0 %v6328, 80
  %v6953 = vpop.permute.xlu0 %6952
  %6954 = vrot.lane.b32.xlu0 %v6329, 80
  %v6955 = vpop.permute.xlu0 %6954
  %6956 = vrot.lane.b32.xlu0 %v6330, 80
  %v6957 = vpop.permute.xlu0 %6956
  %6958 = vrot.lane.b32.xlu0 %v6331, 80
  %v6959 = vpop.permute.xlu0 %6958
  %6960 = vrot.lane.b32.xlu0 %v6332, 80
  %v6961 = vpop.permute.xlu0 %6960
  %6962 = vrot.lane.b32.xlu0 %v6333, 80
  %v6963 = vpop.permute.xlu0 %6962
  %6964 = vrot.lane.b32.xlu0 %v6334, 80
  %v6965 = vpop.permute.xlu0 %6964
  %6966 = vrot.lane.b32.xlu0 %v6335, 80
  %v6967 = vpop.permute.xlu0 %6966
  %6968 = vrot.lane.b32.xlu0 %v6340, 80
  %v6969 = vpop.permute.xlu0 %6968
  %6970 = vrot.lane.b32.xlu0 %v6341, 80
  %v6971 = vpop.permute.xlu0 %6970
  %6972 = vrot.lane.b32.xlu0 %v6342, 80
  %v6973 = vpop.permute.xlu0 %6972
  %6974 = vrot.lane.b32.xlu0 %v6343, 80
  %v6975 = vpop.permute.xlu0 %6974
  %6976 = vrot.lane.b32.xlu0 %v6344, 80
  %v6977 = vpop.permute.xlu0 %6976
  %6978 = vrot.lane.b32.xlu0 %v6345, 80
  %v6979 = vpop.permute.xlu0 %6978
  %6980 = vrot.lane.b32.xlu0 %v6346, 80
  %v6981 = vpop.permute.xlu0 %6980
  %6982 = vrot.lane.b32.xlu0 %v6347, 80
  %v6983 = vpop.permute.xlu0 %6982
  %6984 = vrot.lane.b32.xlu0 %v6352, 80
  %v6985 = vpop.permute.xlu0 %6984
  %6986 = vrot.lane.b32.xlu0 %v6353, 80
  %v6987 = vpop.permute.xlu0 %6986
  %6988 = vrot.lane.b32.xlu0 %v6354, 80
  %v6989 = vpop.permute.xlu0 %6988
  %6990 = vrot.lane.b32.xlu0 %v6355, 80
  %v6991 = vpop.permute.xlu0 %6990
  %6992 = vrot.lane.b32.xlu0 %v6356, 80
  %v6993 = vpop.permute.xlu0 %6992
  %6994 = vrot.lane.b32.xlu0 %v6357, 80
  %v6995 = vpop.permute.xlu0 %6994
  %6996 = vrot.lane.b32.xlu0 %v6358, 80
  %v6997 = vpop.permute.xlu0 %6996
  %6998 = vrot.lane.b32.xlu0 %v6359, 80
  %v6999 = vpop.permute.xlu0 %6998
  %7000 = vrot.lane.b32.xlu0 %v6364, 80
  %v7001 = vpop.permute.xlu0 %7000
  %7002 = vrot.lane.b32.xlu0 %v6365, 80
  %v7003 = vpop.permute.xlu0 %7002
  %7004 = vrot.lane.b32.xlu0 %v6366, 80
  %v7005 = vpop.permute.xlu0 %7004
  %7006 = vrot.lane.b32.xlu0 %v6367, 80
  %v7007 = vpop.permute.xlu0 %7006
  %7008 = vrot.lane.b32.xlu0 %v6368, 80
  %v7009 = vpop.permute.xlu0 %7008
  %7010 = vrot.lane.b32.xlu0 %v6369, 80
  %v7011 = vpop.permute.xlu0 %7010
  %7012 = vrot.lane.b32.xlu0 %v6370, 80
  %v7013 = vpop.permute.xlu0 %7012
  %7014 = vrot.lane.b32.xlu0 %v6371, 80
  %v7015 = vpop.permute.xlu0 %7014
  %7016 = vrot.lane.b32.xlu0 %v6376, 80
  %v7017 = vpop.permute.xlu0 %7016
  %7018 = vrot.lane.b32.xlu0 %v6377, 80
  %v7019 = vpop.permute.xlu0 %7018
  %7020 = vrot.lane.b32.xlu0 %v6378, 80
  %v7021 = vpop.permute.xlu0 %7020
  %7022 = vrot.lane.b32.xlu0 %v6379, 80
  %v7023 = vpop.permute.xlu0 %7022
  %7024 = vrot.lane.b32.xlu0 %v6380, 80
  %v7025 = vpop.permute.xlu0 %7024
  %7026 = vrot.lane.b32.xlu0 %v6381, 80
  %v7027 = vpop.permute.xlu0 %7026
  %7028 = vrot.lane.b32.xlu0 %v6382, 80
  %v7029 = vpop.permute.xlu0 %7028
  %7030 = vrot.lane.b32.xlu0 %v6383, 80
  %v7031 = vpop.permute.xlu0 %7030
  %7047 = vrot.lane.b32.xlu0 %v6300, 100
  %v7048 = vpop.permute.xlu0 %7047
  %7049 = vrot.lane.b32.xlu0 %v6301, 100
  %v7050 = vpop.permute.xlu0 %7049
  %7051 = vrot.lane.b32.xlu0 %v6302, 100
  %v7052 = vpop.permute.xlu0 %7051
  %7053 = vrot.lane.b32.xlu0 %v6303, 100
  %v7054 = vpop.permute.xlu0 %7053
  %7055 = vrot.lane.b32.xlu0 %v6304, 100
  %v7056 = vpop.permute.xlu0 %7055
  %7057 = vrot.lane.b32.xlu0 %v6305, 100
  %v7058 = vpop.permute.xlu0 %7057
  %7059 = vrot.lane.b32.xlu0 %v6306, 100
  %v7060 = vpop.permute.xlu0 %7059
  %7061 = vrot.lane.b32.xlu0 %v6307, 100
  %v7062 = vpop.permute.xlu0 %7061
  %7063 = vrot.lane.b32.xlu0 %v6312, 100
  %v7064 = vpop.permute.xlu0 %7063
  %7065 = vrot.lane.b32.xlu0 %v6313, 100
  %v7066 = vpop.permute.xlu0 %7065
  %7067 = vrot.lane.b32.xlu0 %v6314, 100
  %v7068 = vpop.permute.xlu0 %7067
  %7069 = vrot.lane.b32.xlu0 %v6315, 100
  %v7070 = vpop.permute.xlu0 %7069
  %7071 = vrot.lane.b32.xlu0 %v6316, 100
  %v7072 = vpop.permute.xlu0 %7071
  %7073 = vrot.lane.b32.xlu0 %v6317, 100
  %v7074 = vpop.permute.xlu0 %7073
  %7075 = vrot.lane.b32.xlu0 %v6318, 100
  %v7076 = vpop.permute.xlu0 %7075
  %7077 = vrot.lane.b32.xlu0 %v6319, 100
  %v7078 = vpop.permute.xlu0 %7077
  %7079 = vrot.lane.b32.xlu0 %v6324, 100
  %v7080 = vpop.permute.xlu0 %7079
  %7081 = vrot.lane.b32.xlu0 %v6325, 100
  %v7082 = vpop.permute.xlu0 %7081
  %7083 = vrot.lane.b32.xlu0 %v6326, 100
  %v7084 = vpop.permute.xlu0 %7083
  %7085 = vrot.lane.b32.xlu0 %v6327, 100
  %v7086 = vpop.permute.xlu0 %7085
  %7087 = vrot.lane.b32.xlu0 %v6328, 100
  %v7088 = vpop.permute.xlu0 %7087
  %7089 = vrot.lane.b32.xlu0 %v6329, 100
  %v7090 = vpop.permute.xlu0 %7089
  %7091 = vrot.lane.b32.xlu0 %v6330, 100
  %v7092 = vpop.permute.xlu0 %7091
  %7093 = vrot.lane.b32.xlu0 %v6331, 100
  %v7094 = vpop.permute.xlu0 %7093
  %7095 = vrot.lane.b32.xlu0 %v6336, 100
  %v7096 = vpop.permute.xlu0 %7095
  %7097 = vrot.lane.b32.xlu0 %v6337, 100
  %v7098 = vpop.permute.xlu0 %7097
  %7099 = vrot.lane.b32.xlu0 %v6338, 100
  %v7100 = vpop.permute.xlu0 %7099
  %7101 = vrot.lane.b32.xlu0 %v6339, 100
  %v7102 = vpop.permute.xlu0 %7101
  %7103 = vrot.lane.b32.xlu0 %v6340, 100
  %v7104 = vpop.permute.xlu0 %7103
  %7105 = vrot.lane.b32.xlu0 %v6341, 100
  %v7106 = vpop.permute.xlu0 %7105
  %7107 = vrot.lane.b32.xlu0 %v6342, 100
  %v7108 = vpop.permute.xlu0 %7107
  %7109 = vrot.lane.b32.xlu0 %v6343, 100
  %v7110 = vpop.permute.xlu0 %7109
  %7111 = vrot.lane.b32.xlu0 %v6348, 100
  %v7112 = vpop.permute.xlu0 %7111
  %7113 = vrot.lane.b32.xlu0 %v6349, 100
  %v7114 = vpop.permute.xlu0 %7113
  %7115 = vrot.lane.b32.xlu0 %v6350, 100
  %v7116 = vpop.permute.xlu0 %7115
  %7117 = vrot.lane.b32.xlu0 %v6351, 100
  %v7118 = vpop.permute.xlu0 %7117
  %7119 = vrot.lane.b32.xlu0 %v6352, 100
  %v7120 = vpop.permute.xlu0 %7119
  %7121 = vrot.lane.b32.xlu0 %v6353, 100
  %v7122 = vpop.permute.xlu0 %7121
  %7123 = vrot.lane.b32.xlu0 %v6354, 100
  %v7124 = vpop.permute.xlu0 %7123
  %7125 = vrot.lane.b32.xlu0 %v6355, 100
  %v7126 = vpop.permute.xlu0 %7125
  %7127 = vrot.lane.b32.xlu0 %v6360, 100
  %v7128 = vpop.permute.xlu0 %7127
  %7129 = vrot.lane.b32.xlu0 %v6361, 100
  %v7130 = vpop.permute.xlu0 %7129
  %7131 = vrot.lane.b32.xlu0 %v6362, 100
  %v7132 = vpop.permute.xlu0 %7131
  %7133 = vrot.lane.b32.xlu0 %v6363, 100
  %v7134 = vpop.permute.xlu0 %7133
  %7135 = vrot.lane.b32.xlu0 %v6364, 100
  %v7136 = vpop.permute.xlu0 %7135
  %7137 = vrot.lane.b32.xlu0 %v6365, 100
  %v7138 = vpop.permute.xlu0 %7137
  %7139 = vrot.lane.b32.xlu0 %v6366, 100
  %v7140 = vpop.permute.xlu0 %7139
  %7141 = vrot.lane.b32.xlu0 %v6367, 100
  %v7142 = vpop.permute.xlu0 %7141
  %7143 = vrot.lane.b32.xlu0 %v6372, 100
  %v7144 = vpop.permute.xlu0 %7143
  %7145 = vrot.lane.b32.xlu0 %v6373, 100
  %v7146 = vpop.permute.xlu0 %7145
  %7147 = vrot.lane.b32.xlu0 %v6374, 100
  %v7148 = vpop.permute.xlu0 %7147
  %7149 = vrot.lane.b32.xlu0 %v6375, 100
  %v7150 = vpop.permute.xlu0 %7149
  %7151 = vrot.lane.b32.xlu0 %v6376, 100
  %v7152 = vpop.permute.xlu0 %7151
  %7153 = vrot.lane.b32.xlu0 %v6377, 100
  %v7154 = vpop.permute.xlu0 %7153
  %7155 = vrot.lane.b32.xlu0 %v6378, 100
  %v7156 = vpop.permute.xlu0 %7155
  %7157 = vrot.lane.b32.xlu0 %v6379, 100
  %v7158 = vpop.permute.xlu0 %7157
  %7159 = vrot.lane.b32.xlu0 %v6384, 100
  %v7160 = vpop.permute.xlu0 %7159
  %7161 = vrot.lane.b32.xlu0 %v6385, 100
  %v7162 = vpop.permute.xlu0 %7161
  %7163 = vrot.lane.b32.xlu0 %v6386, 100
  %v7164 = vpop.permute.xlu0 %7163
  %7165 = vrot.lane.b32.xlu0 %v6387, 100
  %v7166 = vpop.permute.xlu0 %7165
  %7167 = vrot.lane.b32.xlu0 %v6388, 100
  %v7168 = vpop.permute.xlu0 %7167
  %7169 = vrot.lane.b32.xlu0 %v6389, 100
  %v7170 = vpop.permute.xlu0 %7169
  %7171 = vrot.lane.b32.xlu0 %v6390, 100
  %v7172 = vpop.permute.xlu0 %7171
  %7173 = vrot.lane.b32.xlu0 %v6391, 100
  %v7174 = vpop.permute.xlu0 %7173
  %7176 = vrot.lane.b32.xlu0 %v6301, 120
  %v7177 = vpop.permute.xlu0 %7176
  %7178 = vrot.lane.b32.xlu0 %v6302, 120
  %v7179 = vpop.permute.xlu0 %7178
  %7180 = vrot.lane.b32.xlu0 %v6303, 120
  %v7181 = vpop.permute.xlu0 %7180
  %7182 = vrot.lane.b32.xlu0 %v6304, 120
  %v7183 = vpop.permute.xlu0 %7182
  %7184 = vrot.lane.b32.xlu0 %v6305, 120
  %v7185 = vpop.permute.xlu0 %7184
  %7186 = vrot.lane.b32.xlu0 %v6306, 120
  %v7187 = vpop.permute.xlu0 %7186
  %7188 = vrot.lane.b32.xlu0 %v6307, 120
  %v7189 = vpop.permute.xlu0 %7188
  %7190 = vrot.lane.b32.xlu0 %v6308, 120
  %v7191 = vpop.permute.xlu0 %7190
  %7192 = vrot.lane.b32.xlu0 %v6313, 120
  %v7193 = vpop.permute.xlu0 %7192
  %7194 = vrot.lane.b32.xlu0 %v6314, 120
  %v7195 = vpop.permute.xlu0 %7194
  %7196 = vrot.lane.b32.xlu0 %v6315, 120
  %v7197 = vpop.permute.xlu0 %7196
  %7198 = vrot.lane.b32.xlu0 %v6316, 120
  %v7199 = vpop.permute.xlu0 %7198
  %7200 = vrot.lane.b32.xlu0 %v6317, 120
  %v7201 = vpop.permute.xlu0 %7200
  %7202 = vrot.lane.b32.xlu0 %v6318, 120
  %v7203 = vpop.permute.xlu0 %7202
  %7204 = vrot.lane.b32.xlu0 %v6319, 120
  %v7205 = vpop.permute.xlu0 %7204
  %7206 = vrot.lane.b32.xlu0 %v6320, 120
  %v7207 = vpop.permute.xlu0 %7206
  %7208 = vrot.lane.b32.xlu0 %v6325, 120
  %v7209 = vpop.permute.xlu0 %7208
  %7210 = vrot.lane.b32.xlu0 %v6326, 120
  %v7211 = vpop.permute.xlu0 %7210
  %7212 = vrot.lane.b32.xlu0 %v6327, 120
  %v7213 = vpop.permute.xlu0 %7212
  %7214 = vrot.lane.b32.xlu0 %v6328, 120
  %v7215 = vpop.permute.xlu0 %7214
  %7216 = vrot.lane.b32.xlu0 %v6329, 120
  %v7217 = vpop.permute.xlu0 %7216
  %7218 = vrot.lane.b32.xlu0 %v6330, 120
  %v7219 = vpop.permute.xlu0 %7218
  %7220 = vrot.lane.b32.xlu0 %v6331, 120
  %v7221 = vpop.permute.xlu0 %7220
  %7222 = vrot.lane.b32.xlu0 %v6332, 120
  %v7223 = vpop.permute.xlu0 %7222
  %7224 = vrot.lane.b32.xlu0 %v6337, 120
  %v7225 = vpop.permute.xlu0 %7224
  %7226 = vrot.lane.b32.xlu0 %v6338, 120
  %v7227 = vpop.permute.xlu0 %7226
  %7228 = vrot.lane.b32.xlu0 %v6339, 120
  %v7229 = vpop.permute.xlu0 %7228
  %7230 = vrot.lane.b32.xlu0 %v6340, 120
  %v7231 = vpop.permute.xlu0 %7230
  %7232 = vrot.lane.b32.xlu0 %v6341, 120
  %v7233 = vpop.permute.xlu0 %7232
  %7234 = vrot.lane.b32.xlu0 %v6342, 120
  %v7235 = vpop.permute.xlu0 %7234
  %7236 = vrot.lane.b32.xlu0 %v6343, 120
  %v7237 = vpop.permute.xlu0 %7236
  %7238 = vrot.lane.b32.xlu0 %v6344, 120
  %v7239 = vpop.permute.xlu0 %7238
  %7240 = vrot.lane.b32.xlu0 %v6349, 120
  %v7241 = vpop.permute.xlu0 %7240
  %7242 = vrot.lane.b32.xlu0 %v6350, 120
  %v7243 = vpop.permute.xlu0 %7242
  %7244 = vrot.lane.b32.xlu0 %v6351, 120
  %v7245 = vpop.permute.xlu0 %7244
  %7246 = vrot.lane.b32.xlu0 %v6352, 120
  %v7247 = vpop.permute.xlu0 %7246
  %7248 = vrot.lane.b32.xlu0 %v6353, 120
  %v7249 = vpop.permute.xlu0 %7248
  %7250 = vrot.lane.b32.xlu0 %v6354, 120
  %v7251 = vpop.permute.xlu0 %7250
  %7252 = vrot.lane.b32.xlu0 %v6355, 120
  %v7253 = vpop.permute.xlu0 %7252
  %7254 = vrot.lane.b32.xlu0 %v6356, 120
  %v7255 = vpop.permute.xlu0 %7254
  %7256 = vrot.lane.b32.xlu0 %v6361, 120
  %v7257 = vpop.permute.xlu0 %7256
  %7258 = vrot.lane.b32.xlu0 %v6362, 120
  %v7259 = vpop.permute.xlu0 %7258
  %7260 = vrot.lane.b32.xlu0 %v6363, 120
  %v7261 = vpop.permute.xlu0 %7260
  %7262 = vrot.lane.b32.xlu0 %v6364, 120
  %v7263 = vpop.permute.xlu0 %7262
  %7264 = vrot.lane.b32.xlu0 %v6365, 120
  %v7265 = vpop.permute.xlu0 %7264
  %7266 = vrot.lane.b32.xlu0 %v6366, 120
  %v7267 = vpop.permute.xlu0 %7266
  %7268 = vrot.lane.b32.xlu0 %v6367, 120
  %v7269 = vpop.permute.xlu0 %7268
  %7270 = vrot.lane.b32.xlu0 %v6368, 120
  %v7271 = vpop.permute.xlu0 %7270
  %7272 = vrot.lane.b32.xlu0 %v6373, 120
  %v7273 = vpop.permute.xlu0 %7272
  %7274 = vrot.lane.b32.xlu0 %v6374, 120
  %v7275 = vpop.permute.xlu0 %7274
  %7276 = vrot.lane.b32.xlu0 %v6375, 120
  %v7277 = vpop.permute.xlu0 %7276
  %7278 = vrot.lane.b32.xlu0 %v6376, 120
  %v7279 = vpop.permute.xlu0 %7278
  %7280 = vrot.lane.b32.xlu0 %v6377, 120
  %v7281 = vpop.permute.xlu0 %7280
  %7282 = vrot.lane.b32.xlu0 %v6378, 120
  %v7283 = vpop.permute.xlu0 %7282
  %7284 = vrot.lane.b32.xlu0 %v6379, 120
  %v7285 = vpop.permute.xlu0 %7284
  %7286 = vrot.lane.b32.xlu0 %v6380, 120
  %v7287 = vpop.permute.xlu0 %7286
  %7288 = vrot.lane.b32.xlu0 %v6385, 120
  %v7289 = vpop.permute.xlu0 %7288
  %7290 = vrot.lane.b32.xlu0 %v6386, 120
  %v7291 = vpop.permute.xlu0 %7290
  %7292 = vrot.lane.b32.xlu0 %v6387, 120
  %v7293 = vpop.permute.xlu0 %7292
  %7294 = vrot.lane.b32.xlu0 %v6388, 120
  %v7295 = vpop.permute.xlu0 %7294
  %7296 = vrot.lane.b32.xlu0 %v6389, 120
  %v7297 = vpop.permute.xlu0 %7296
  %7298 = vrot.lane.b32.xlu0 %v6390, 120
  %v7299 = vpop.permute.xlu0 %7298
  %7300 = vrot.lane.b32.xlu0 %v6391, 120
  %v7301 = vpop.permute.xlu0 %7300
  %7302 = vrot.lane.b32.xlu0 %v6392, 120
  %v7303 = vpop.permute.xlu0 %7302
  %7305 = vrot.lane.b32.xlu0 %v6302, 12
  %v7306 = vpop.permute.xlu0 %7305
  %7307 = vrot.lane.b32.xlu0 %v6303, 12
  %v7308 = vpop.permute.xlu0 %7307
  %7309 = vrot.lane.b32.xlu0 %v6304, 12
  %v7310 = vpop.permute.xlu0 %7309
  %7311 = vrot.lane.b32.xlu0 %v6305, 12
  %v7312 = vpop.permute.xlu0 %7311
  %7313 = vrot.lane.b32.xlu0 %v6306, 12
  %v7314 = vpop.permute.xlu0 %7313
  %7315 = vrot.lane.b32.xlu0 %v6307, 12
  %v7316 = vpop.permute.xlu0 %7315
  %7317 = vrot.lane.b32.xlu0 %v6308, 12
  %v7318 = vpop.permute.xlu0 %7317
  %7319 = vrot.lane.b32.xlu0 %v6309, 12
  %v7320 = vpop.permute.xlu0 %7319
  %7321 = vrot.lane.b32.xlu0 %v6314, 12
  %v7322 = vpop.permute.xlu0 %7321
  %7323 = vrot.lane.b32.xlu0 %v6315, 12
  %v7324 = vpop.permute.xlu0 %7323
  %7325 = vrot.lane.b32.xlu0 %v6316, 12
  %v7326 = vpop.permute.xlu0 %7325
  %7327 = vrot.lane.b32.xlu0 %v6317, 12
  %v7328 = vpop.permute.xlu0 %7327
  %7329 = vrot.lane.b32.xlu0 %v6318, 12
  %v7330 = vpop.permute.xlu0 %7329
  %7331 = vrot.lane.b32.xlu0 %v6319, 12
  %v7332 = vpop.permute.xlu0 %7331
  %7333 = vrot.lane.b32.xlu0 %v6320, 12
  %v7334 = vpop.permute.xlu0 %7333
  %7335 = vrot.lane.b32.xlu0 %v6321, 12
  %v7336 = vpop.permute.xlu0 %7335
  %7337 = vrot.lane.b32.xlu0 %v6326, 12
  %v7338 = vpop.permute.xlu0 %7337
  %7339 = vrot.lane.b32.xlu0 %v6327, 12
  %v7340 = vpop.permute.xlu0 %7339
  %7341 = vrot.lane.b32.xlu0 %v6328, 12
  %v7342 = vpop.permute.xlu0 %7341
  %7343 = vrot.lane.b32.xlu0 %v6329, 12
  %v7344 = vpop.permute.xlu0 %7343
  %7345 = vrot.lane.b32.xlu0 %v6330, 12
  %v7346 = vpop.permute.xlu0 %7345
  %7347 = vrot.lane.b32.xlu0 %v6331, 12
  %v7348 = vpop.permute.xlu0 %7347
  %7349 = vrot.lane.b32.xlu0 %v6332, 12
  %v7350 = vpop.permute.xlu0 %7349
  %7351 = vrot.lane.b32.xlu0 %v6333, 12
  %v7352 = vpop.permute.xlu0 %7351
  %7353 = vrot.lane.b32.xlu0 %v6338, 12
  %v7354 = vpop.permute.xlu0 %7353
  %7355 = vrot.lane.b32.xlu0 %v6339, 12
  %v7356 = vpop.permute.xlu0 %7355
  %7357 = vrot.lane.b32.xlu0 %v6340, 12
  %v7358 = vpop.permute.xlu0 %7357
  %7359 = vrot.lane.b32.xlu0 %v6341, 12
  %v7360 = vpop.permute.xlu0 %7359
  %7361 = vrot.lane.b32.xlu0 %v6342, 12
  %v7362 = vpop.permute.xlu0 %7361
  %7363 = vrot.lane.b32.xlu0 %v6343, 12
  %v7364 = vpop.permute.xlu0 %7363
  %7365 = vrot.lane.b32.xlu0 %v6344, 12
  %v7366 = vpop.permute.xlu0 %7365
  %7367 = vrot.lane.b32.xlu0 %v6345, 12
  %v7368 = vpop.permute.xlu0 %7367
  %7369 = vrot.lane.b32.xlu0 %v6350, 12
  %v7370 = vpop.permute.xlu0 %7369
  %7371 = vrot.lane.b32.xlu0 %v6351, 12
  %v7372 = vpop.permute.xlu0 %7371
  %7373 = vrot.lane.b32.xlu0 %v6352, 12
  %v7374 = vpop.permute.xlu0 %7373
  %7375 = vrot.lane.b32.xlu0 %v6353, 12
  %v7376 = vpop.permute.xlu0 %7375
  %7377 = vrot.lane.b32.xlu0 %v6354, 12
  %v7378 = vpop.permute.xlu0 %7377
  %7379 = vrot.lane.b32.xlu0 %v6355, 12
  %v7380 = vpop.permute.xlu0 %7379
  %7381 = vrot.lane.b32.xlu0 %v6356, 12
  %v7382 = vpop.permute.xlu0 %7381
  %7383 = vrot.lane.b32.xlu0 %v6357, 12
  %v7384 = vpop.permute.xlu0 %7383
  %7385 = vrot.lane.b32.xlu0 %v6362, 12
  %v7386 = vpop.permute.xlu0 %7385
  %7387 = vrot.lane.b32.xlu0 %v6363, 12
  %v7388 = vpop.permute.xlu0 %7387
  %7389 = vrot.lane.b32.xlu0 %v6364, 12
  %v7390 = vpop.permute.xlu0 %7389
  %7391 = vrot.lane.b32.xlu0 %v6365, 12
  %v7392 = vpop.permute.xlu0 %7391
  %7393 = vrot.lane.b32.xlu0 %v6366, 12
  %v7394 = vpop.permute.xlu0 %7393
  %7395 = vrot.lane.b32.xlu0 %v6367, 12
  %v7396 = vpop.permute.xlu0 %7395
  %7397 = vrot.lane.b32.xlu0 %v6368, 12
  %v7398 = vpop.permute.xlu0 %7397
  %7399 = vrot.lane.b32.xlu0 %v6369, 12
  %v7400 = vpop.permute.xlu0 %7399
  %7401 = vrot.lane.b32.xlu0 %v6374, 12
  %v7402 = vpop.permute.xlu0 %7401
  %7403 = vrot.lane.b32.xlu0 %v6375, 12
  %v7404 = vpop.permute.xlu0 %7403
  %7405 = vrot.lane.b32.xlu0 %v6376, 12
  %v7406 = vpop.permute.xlu0 %7405
  %7407 = vrot.lane.b32.xlu0 %v6377, 12
  %v7408 = vpop.permute.xlu0 %7407
  %7409 = vrot.lane.b32.xlu0 %v6378, 12
  %v7410 = vpop.permute.xlu0 %7409
  %7411 = vrot.lane.b32.xlu0 %v6379, 12
  %v7412 = vpop.permute.xlu0 %7411
  %7413 = vrot.lane.b32.xlu0 %v6380, 12
  %v7414 = vpop.permute.xlu0 %7413
  %7415 = vrot.lane.b32.xlu0 %v6381, 12
  %v7416 = vpop.permute.xlu0 %7415
  %7417 = vrot.lane.b32.xlu0 %v6386, 12
  %v7418 = vpop.permute.xlu0 %7417
  %7419 = vrot.lane.b32.xlu0 %v6387, 12
  %v7420 = vpop.permute.xlu0 %7419
  %7421 = vrot.lane.b32.xlu0 %v6388, 12
  %v7422 = vpop.permute.xlu0 %7421
  %7423 = vrot.lane.b32.xlu0 %v6389, 12
  %v7424 = vpop.permute.xlu0 %7423
  %7425 = vrot.lane.b32.xlu0 %v6390, 12
  %v7426 = vpop.permute.xlu0 %7425
  %7427 = vrot.lane.b32.xlu0 %v6391, 12
  %v7428 = vpop.permute.xlu0 %7427
  %7429 = vrot.lane.b32.xlu0 %v6392, 12
  %v7430 = vpop.permute.xlu0 %7429
  %7431 = vrot.lane.b32.xlu0 %v6393, 12
  %v7432 = vpop.permute.xlu0 %7431
  %7434 = vrot.lane.b32.xlu0 %v6303, 32
  %v7435 = vpop.permute.xlu0 %7434
  %7436 = vrot.lane.b32.xlu0 %v6304, 32
  %v7437 = vpop.permute.xlu0 %7436
  %7438 = vrot.lane.b32.xlu0 %v6305, 32
  %v7439 = vpop.permute.xlu0 %7438
  %7440 = vrot.lane.b32.xlu0 %v6306, 32
  %v7441 = vpop.permute.xlu0 %7440
  %7442 = vrot.lane.b32.xlu0 %v6307, 32
  %v7443 = vpop.permute.xlu0 %7442
  %7444 = vrot.lane.b32.xlu0 %v6308, 32
  %v7445 = vpop.permute.xlu0 %7444
  %7446 = vrot.lane.b32.xlu0 %v6309, 32
  %v7447 = vpop.permute.xlu0 %7446
  %7448 = vrot.lane.b32.xlu0 %v6310, 32
  %v7449 = vpop.permute.xlu0 %7448
  %7450 = vrot.lane.b32.xlu0 %v6315, 32
  %v7451 = vpop.permute.xlu0 %7450
  %7452 = vrot.lane.b32.xlu0 %v6316, 32
  %v7453 = vpop.permute.xlu0 %7452
  %7454 = vrot.lane.b32.xlu0 %v6317, 32
  %v7455 = vpop.permute.xlu0 %7454
  %7456 = vrot.lane.b32.xlu0 %v6318, 32
  %v7457 = vpop.permute.xlu0 %7456
  %7458 = vrot.lane.b32.xlu0 %v6319, 32
  %v7459 = vpop.permute.xlu0 %7458
  %7460 = vrot.lane.b32.xlu0 %v6320, 32
  %v7461 = vpop.permute.xlu0 %7460
  %7462 = vrot.lane.b32.xlu0 %v6321, 32
  %v7463 = vpop.permute.xlu0 %7462
  %7464 = vrot.lane.b32.xlu0 %v6322, 32
  %v7465 = vpop.permute.xlu0 %7464
  %7466 = vrot.lane.b32.xlu0 %v6327, 32
  %v7467 = vpop.permute.xlu0 %7466
  %7468 = vrot.lane.b32.xlu0 %v6328, 32
  %v7469 = vpop.permute.xlu0 %7468
  %7470 = vrot.lane.b32.xlu0 %v6329, 32
  %v7471 = vpop.permute.xlu0 %7470
  %7472 = vrot.lane.b32.xlu0 %v6330, 32
  %v7473 = vpop.permute.xlu0 %7472
  %7474 = vrot.lane.b32.xlu0 %v6331, 32
  %v7475 = vpop.permute.xlu0 %7474
  %7476 = vrot.lane.b32.xlu0 %v6332, 32
  %v7477 = vpop.permute.xlu0 %7476
  %7478 = vrot.lane.b32.xlu0 %v6333, 32
  %v7479 = vpop.permute.xlu0 %7478
  %7480 = vrot.lane.b32.xlu0 %v6334, 32
  %v7481 = vpop.permute.xlu0 %7480
  %7482 = vrot.lane.b32.xlu0 %v6339, 32
  %v7483 = vpop.permute.xlu0 %7482
  %7484 = vrot.lane.b32.xlu0 %v6340, 32
  %v7485 = vpop.permute.xlu0 %7484
  %7486 = vrot.lane.b32.xlu0 %v6341, 32
  %v7487 = vpop.permute.xlu0 %7486
  %7488 = vrot.lane.b32.xlu0 %v6342, 32
  %v7489 = vpop.permute.xlu0 %7488
  %7490 = vrot.lane.b32.xlu0 %v6343, 32
  %v7491 = vpop.permute.xlu0 %7490
  %7492 = vrot.lane.b32.xlu0 %v6344, 32
  %v7493 = vpop.permute.xlu0 %7492
  %7494 = vrot.lane.b32.xlu0 %v6345, 32
  %v7495 = vpop.permute.xlu0 %7494
  %7496 = vrot.lane.b32.xlu0 %v6346, 32
  %v7497 = vpop.permute.xlu0 %7496
  %7498 = vrot.lane.b32.xlu0 %v6351, 32
  %v7499 = vpop.permute.xlu0 %7498
  %7500 = vrot.lane.b32.xlu0 %v6352, 32
  %v7501 = vpop.permute.xlu0 %7500
  %7502 = vrot.lane.b32.xlu0 %v6353, 32
  %v7503 = vpop.permute.xlu0 %7502
  %7504 = vrot.lane.b32.xlu0 %v6354, 32
  %v7505 = vpop.permute.xlu0 %7504
  %7506 = vrot.lane.b32.xlu0 %v6355, 32
  %v7507 = vpop.permute.xlu0 %7506
  %7508 = vrot.lane.b32.xlu0 %v6356, 32
  %v7509 = vpop.permute.xlu0 %7508
  %7510 = vrot.lane.b32.xlu0 %v6357, 32
  %v7511 = vpop.permute.xlu0 %7510
  %7512 = vrot.lane.b32.xlu0 %v6358, 32
  %v7513 = vpop.permute.xlu0 %7512
  %7514 = vrot.lane.b32.xlu0 %v6363, 32
  %v7515 = vpop.permute.xlu0 %7514
  %7516 = vrot.lane.b32.xlu0 %v6364, 32
  %v7517 = vpop.permute.xlu0 %7516
  %7518 = vrot.lane.b32.xlu0 %v6365, 32
  %v7519 = vpop.permute.xlu0 %7518
  %7520 = vrot.lane.b32.xlu0 %v6366, 32
  %v7521 = vpop.permute.xlu0 %7520
  %7522 = vrot.lane.b32.xlu0 %v6367, 32
  %v7523 = vpop.permute.xlu0 %7522
  %7524 = vrot.lane.b32.xlu0 %v6368, 32
  %v7525 = vpop.permute.xlu0 %7524
  %7526 = vrot.lane.b32.xlu0 %v6369, 32
  %v7527 = vpop.permute.xlu0 %7526
  %7528 = vrot.lane.b32.xlu0 %v6370, 32
  %v7529 = vpop.permute.xlu0 %7528
  %7530 = vrot.lane.b32.xlu0 %v6375, 32
  %v7531 = vpop.permute.xlu0 %7530
  %7532 = vrot.lane.b32.xlu0 %v6376, 32
  %v7533 = vpop.permute.xlu0 %7532
  %7534 = vrot.lane.b32.xlu0 %v6377, 32
  %v7535 = vpop.permute.xlu0 %7534
  %7536 = vrot.lane.b32.xlu0 %v6378, 32
  %v7537 = vpop.permute.xlu0 %7536
  %7538 = vrot.lane.b32.xlu0 %v6379, 32
  %v7539 = vpop.permute.xlu0 %7538
  %7540 = vrot.lane.b32.xlu0 %v6380, 32
  %v7541 = vpop.permute.xlu0 %7540
  %7542 = vrot.lane.b32.xlu0 %v6381, 32
  %v7543 = vpop.permute.xlu0 %7542
  %7544 = vrot.lane.b32.xlu0 %v6382, 32
  %v7545 = vpop.permute.xlu0 %7544
  %7546 = vrot.lane.b32.xlu0 %v6387, 32
  %v7547 = vpop.permute.xlu0 %7546
  %7548 = vrot.lane.b32.xlu0 %v6388, 32
  %v7549 = vpop.permute.xlu0 %7548
  %7550 = vrot.lane.b32.xlu0 %v6389, 32
  %v7551 = vpop.permute.xlu0 %7550
  %7552 = vrot.lane.b32.xlu0 %v6390, 32
  %v7553 = vpop.permute.xlu0 %7552
  %7554 = vrot.lane.b32.xlu0 %v6391, 32
  %v7555 = vpop.permute.xlu0 %7554
  %7556 = vrot.lane.b32.xlu0 %v6392, 32
  %v7557 = vpop.permute.xlu0 %7556
  %7558 = vrot.lane.b32.xlu0 %v6393, 32
  %v7559 = vpop.permute.xlu0 %7558
  %7560 = vrot.lane.b32.xlu0 %v6394, 32
  %v7561 = vpop.permute.xlu0 %7560
  %7563 = vrot.lane.b32.xlu0 %v6304, 52
  %v7564 = vpop.permute.xlu0 %7563
  %7565 = vrot.lane.b32.xlu0 %v6305, 52
  %v7566 = vpop.permute.xlu0 %7565
  %7567 = vrot.lane.b32.xlu0 %v6306, 52
  %v7568 = vpop.permute.xlu0 %7567
  %7569 = vrot.lane.b32.xlu0 %v6307, 52
  %v7570 = vpop.permute.xlu0 %7569
  %7571 = vrot.lane.b32.xlu0 %v6308, 52
  %v7572 = vpop.permute.xlu0 %7571
  %7573 = vrot.lane.b32.xlu0 %v6309, 52
  %v7574 = vpop.permute.xlu0 %7573
  %7575 = vrot.lane.b32.xlu0 %v6310, 52
  %v7576 = vpop.permute.xlu0 %7575
  %7577 = vrot.lane.b32.xlu0 %v6311, 52
  %v7578 = vpop.permute.xlu0 %7577
  %7579 = vrot.lane.b32.xlu0 %v6316, 52
  %v7580 = vpop.permute.xlu0 %7579
  %7581 = vrot.lane.b32.xlu0 %v6317, 52
  %v7582 = vpop.permute.xlu0 %7581
  %7583 = vrot.lane.b32.xlu0 %v6318, 52
  %v7584 = vpop.permute.xlu0 %7583
  %7585 = vrot.lane.b32.xlu0 %v6319, 52
  %v7586 = vpop.permute.xlu0 %7585
  %7587 = vrot.lane.b32.xlu0 %v6320, 52
  %v7588 = vpop.permute.xlu0 %7587
  %7589 = vrot.lane.b32.xlu0 %v6321, 52
  %v7590 = vpop.permute.xlu0 %7589
  %7591 = vrot.lane.b32.xlu0 %v6322, 52
  %v7592 = vpop.permute.xlu0 %7591
  %7593 = vrot.lane.b32.xlu0 %v6323, 52
  %v7594 = vpop.permute.xlu0 %7593
  %7595 = vrot.lane.b32.xlu0 %v6328, 52
  %v7596 = vpop.permute.xlu0 %7595
  %7597 = vrot.lane.b32.xlu0 %v6329, 52
  %v7598 = vpop.permute.xlu0 %7597
  %7599 = vrot.lane.b32.xlu0 %v6330, 52
  %v7600 = vpop.permute.xlu0 %7599
  %7601 = vrot.lane.b32.xlu0 %v6331, 52
  %v7602 = vpop.permute.xlu0 %7601
  %7603 = vrot.lane.b32.xlu0 %v6332, 52
  %v7604 = vpop.permute.xlu0 %7603
  %7605 = vrot.lane.b32.xlu0 %v6333, 52
  %v7606 = vpop.permute.xlu0 %7605
  %7607 = vrot.lane.b32.xlu0 %v6334, 52
  %v7608 = vpop.permute.xlu0 %7607
  %7609 = vrot.lane.b32.xlu0 %v6335, 52
  %v7610 = vpop.permute.xlu0 %7609
  %7611 = vrot.lane.b32.xlu0 %v6340, 52
  %v7612 = vpop.permute.xlu0 %7611
  %7613 = vrot.lane.b32.xlu0 %v6341, 52
  %v7614 = vpop.permute.xlu0 %7613
  %7615 = vrot.lane.b32.xlu0 %v6342, 52
  %v7616 = vpop.permute.xlu0 %7615
  %7617 = vrot.lane.b32.xlu0 %v6343, 52
  %v7618 = vpop.permute.xlu0 %7617
  %7619 = vrot.lane.b32.xlu0 %v6344, 52
  %v7620 = vpop.permute.xlu0 %7619
  %7621 = vrot.lane.b32.xlu0 %v6345, 52
  %v7622 = vpop.permute.xlu0 %7621
  %7623 = vrot.lane.b32.xlu0 %v6346, 52
  %v7624 = vpop.permute.xlu0 %7623
  %7625 = vrot.lane.b32.xlu0 %v6347, 52
  %v7626 = vpop.permute.xlu0 %7625
  %7627 = vrot.lane.b32.xlu0 %v6352, 52
  %v7628 = vpop.permute.xlu0 %7627
  %7629 = vrot.lane.b32.xlu0 %v6353, 52
  %v7630 = vpop.permute.xlu0 %7629
  %7631 = vrot.lane.b32.xlu0 %v6354, 52
  %v7632 = vpop.permute.xlu0 %7631
  %7633 = vrot.lane.b32.xlu0 %v6355, 52
  %v7634 = vpop.permute.xlu0 %7633
  %7635 = vrot.lane.b32.xlu0 %v6356, 52
  %v7636 = vpop.permute.xlu0 %7635
  %7637 = vrot.lane.b32.xlu0 %v6357, 52
  %v7638 = vpop.permute.xlu0 %7637
  %7639 = vrot.lane.b32.xlu0 %v6358, 52
  %v7640 = vpop.permute.xlu0 %7639
  %7641 = vrot.lane.b32.xlu0 %v6359, 52
  %v7642 = vpop.permute.xlu0 %7641
  %7643 = vrot.lane.b32.xlu0 %v6364, 52
  %v7644 = vpop.permute.xlu0 %7643
  %7645 = vrot.lane.b32.xlu0 %v6365, 52
  %v7646 = vpop.permute.xlu0 %7645
  %7647 = vrot.lane.b32.xlu0 %v6366, 52
  %v7648 = vpop.permute.xlu0 %7647
  %7649 = vrot.lane.b32.xlu0 %v6367, 52
  %v7650 = vpop.permute.xlu0 %7649
  %7651 = vrot.lane.b32.xlu0 %v6368, 52
  %v7652 = vpop.permute.xlu0 %7651
  %7653 = vrot.lane.b32.xlu0 %v6369, 52
  %v7654 = vpop.permute.xlu0 %7653
  %7655 = vrot.lane.b32.xlu0 %v6370, 52
  %v7656 = vpop.permute.xlu0 %7655
  %7657 = vrot.lane.b32.xlu0 %v6371, 52
  %v7658 = vpop.permute.xlu0 %7657
  %7659 = vrot.lane.b32.xlu0 %v6376, 52
  %v7660 = vpop.permute.xlu0 %7659
  %7661 = vrot.lane.b32.xlu0 %v6377, 52
  %v7662 = vpop.permute.xlu0 %7661
  %7663 = vrot.lane.b32.xlu0 %v6378, 52
  %v7664 = vpop.permute.xlu0 %7663
  %7665 = vrot.lane.b32.xlu0 %v6379, 52
  %v7666 = vpop.permute.xlu0 %7665
  %7667 = vrot.lane.b32.xlu0 %v6380, 52
  %v7668 = vpop.permute.xlu0 %7667
  %7669 = vrot.lane.b32.xlu0 %v6381, 52
  %v7670 = vpop.permute.xlu0 %7669
  %7671 = vrot.lane.b32.xlu0 %v6382, 52
  %v7672 = vpop.permute.xlu0 %7671
  %7673 = vrot.lane.b32.xlu0 %v6383, 52
  %v7674 = vpop.permute.xlu0 %7673
  %7675 = vrot.lane.b32.xlu0 %v6388, 52
  %v7676 = vpop.permute.xlu0 %7675
  %7677 = vrot.lane.b32.xlu0 %v6389, 52
  %v7678 = vpop.permute.xlu0 %7677
  %7679 = vrot.lane.b32.xlu0 %v6390, 52
  %v7680 = vpop.permute.xlu0 %7679
  %7681 = vrot.lane.b32.xlu0 %v6391, 52
  %v7682 = vpop.permute.xlu0 %7681
  %7683 = vrot.lane.b32.xlu0 %v6392, 52
  %v7684 = vpop.permute.xlu0 %7683
  %7685 = vrot.lane.b32.xlu0 %v6393, 52
  %v7686 = vpop.permute.xlu0 %7685
  %7687 = vrot.lane.b32.xlu0 %v6394, 52
  %v7688 = vpop.permute.xlu0 %7687
  %7689 = vrot.lane.b32.xlu0 %v6395, 52
  %v7690 = vpop.permute.xlu0 %7689
  %7699 = vrot.lane.b32.xlu0 %v6312, 72
  %v7700 = vpop.permute.xlu0 %7699
  %7701 = vrot.lane.b32.xlu0 %v6313, 72
  %v7702 = vpop.permute.xlu0 %7701
  %7703 = vrot.lane.b32.xlu0 %v6314, 72
  %v7704 = vpop.permute.xlu0 %7703
  %7705 = vrot.lane.b32.xlu0 %v6315, 72
  %v7706 = vpop.permute.xlu0 %7705
  %7707 = vrot.lane.b32.xlu0 %v6316, 72
  %v7708 = vpop.permute.xlu0 %7707
  %7709 = vrot.lane.b32.xlu0 %v6317, 72
  %v7710 = vpop.permute.xlu0 %7709
  %7711 = vrot.lane.b32.xlu0 %v6318, 72
  %v7712 = vpop.permute.xlu0 %7711
  %7713 = vrot.lane.b32.xlu0 %v6319, 72
  %v7714 = vpop.permute.xlu0 %7713
  %7715 = vrot.lane.b32.xlu0 %v6324, 72
  %v7716 = vpop.permute.xlu0 %7715
  %7717 = vrot.lane.b32.xlu0 %v6325, 72
  %v7718 = vpop.permute.xlu0 %7717
  %7719 = vrot.lane.b32.xlu0 %v6326, 72
  %v7720 = vpop.permute.xlu0 %7719
  %7721 = vrot.lane.b32.xlu0 %v6327, 72
  %v7722 = vpop.permute.xlu0 %7721
  %7723 = vrot.lane.b32.xlu0 %v6328, 72
  %v7724 = vpop.permute.xlu0 %7723
  %7725 = vrot.lane.b32.xlu0 %v6329, 72
  %v7726 = vpop.permute.xlu0 %7725
  %7727 = vrot.lane.b32.xlu0 %v6330, 72
  %v7728 = vpop.permute.xlu0 %7727
  %7729 = vrot.lane.b32.xlu0 %v6331, 72
  %v7730 = vpop.permute.xlu0 %7729
  %7731 = vrot.lane.b32.xlu0 %v6336, 72
  %v7732 = vpop.permute.xlu0 %7731
  %7733 = vrot.lane.b32.xlu0 %v6337, 72
  %v7734 = vpop.permute.xlu0 %7733
  %7735 = vrot.lane.b32.xlu0 %v6338, 72
  %v7736 = vpop.permute.xlu0 %7735
  %7737 = vrot.lane.b32.xlu0 %v6339, 72
  %v7738 = vpop.permute.xlu0 %7737
  %7739 = vrot.lane.b32.xlu0 %v6340, 72
  %v7740 = vpop.permute.xlu0 %7739
  %7741 = vrot.lane.b32.xlu0 %v6341, 72
  %v7742 = vpop.permute.xlu0 %7741
  %7743 = vrot.lane.b32.xlu0 %v6342, 72
  %v7744 = vpop.permute.xlu0 %7743
  %7745 = vrot.lane.b32.xlu0 %v6343, 72
  %v7746 = vpop.permute.xlu0 %7745
  %7747 = vrot.lane.b32.xlu0 %v6348, 72
  %v7748 = vpop.permute.xlu0 %7747
  %7749 = vrot.lane.b32.xlu0 %v6349, 72
  %v7750 = vpop.permute.xlu0 %7749
  %7751 = vrot.lane.b32.xlu0 %v6350, 72
  %v7752 = vpop.permute.xlu0 %7751
  %7753 = vrot.lane.b32.xlu0 %v6351, 72
  %v7754 = vpop.permute.xlu0 %7753
  %7755 = vrot.lane.b32.xlu0 %v6352, 72
  %v7756 = vpop.permute.xlu0 %7755
  %7757 = vrot.lane.b32.xlu0 %v6353, 72
  %v7758 = vpop.permute.xlu0 %7757
  %7759 = vrot.lane.b32.xlu0 %v6354, 72
  %v7760 = vpop.permute.xlu0 %7759
  %7761 = vrot.lane.b32.xlu0 %v6355, 72
  %v7762 = vpop.permute.xlu0 %7761
  %7763 = vrot.lane.b32.xlu0 %v6360, 72
  %v7764 = vpop.permute.xlu0 %7763
  %7765 = vrot.lane.b32.xlu0 %v6361, 72
  %v7766 = vpop.permute.xlu0 %7765
  %7767 = vrot.lane.b32.xlu0 %v6362, 72
  %v7768 = vpop.permute.xlu0 %7767
  %7769 = vrot.lane.b32.xlu0 %v6363, 72
  %v7770 = vpop.permute.xlu0 %7769
  %7771 = vrot.lane.b32.xlu0 %v6364, 72
  %v7772 = vpop.permute.xlu0 %7771
  %7773 = vrot.lane.b32.xlu0 %v6365, 72
  %v7774 = vpop.permute.xlu0 %7773
  %7775 = vrot.lane.b32.xlu0 %v6366, 72
  %v7776 = vpop.permute.xlu0 %7775
  %7777 = vrot.lane.b32.xlu0 %v6367, 72
  %v7778 = vpop.permute.xlu0 %7777
  %7779 = vrot.lane.b32.xlu0 %v6372, 72
  %v7780 = vpop.permute.xlu0 %7779
  %7781 = vrot.lane.b32.xlu0 %v6373, 72
  %v7782 = vpop.permute.xlu0 %7781
  %7783 = vrot.lane.b32.xlu0 %v6374, 72
  %v7784 = vpop.permute.xlu0 %7783
  %7785 = vrot.lane.b32.xlu0 %v6375, 72
  %v7786 = vpop.permute.xlu0 %7785
  %7787 = vrot.lane.b32.xlu0 %v6376, 72
  %v7788 = vpop.permute.xlu0 %7787
  %7789 = vrot.lane.b32.xlu0 %v6377, 72
  %v7790 = vpop.permute.xlu0 %7789
  %7791 = vrot.lane.b32.xlu0 %v6378, 72
  %v7792 = vpop.permute.xlu0 %7791
  %7793 = vrot.lane.b32.xlu0 %v6379, 72
  %v7794 = vpop.permute.xlu0 %7793
  %7795 = vrot.lane.b32.xlu0 %v6384, 72
  %v7796 = vpop.permute.xlu0 %7795
  %7797 = vrot.lane.b32.xlu0 %v6385, 72
  %v7798 = vpop.permute.xlu0 %7797
  %7799 = vrot.lane.b32.xlu0 %v6386, 72
  %v7800 = vpop.permute.xlu0 %7799
  %7801 = vrot.lane.b32.xlu0 %v6387, 72
  %v7802 = vpop.permute.xlu0 %7801
  %7803 = vrot.lane.b32.xlu0 %v6388, 72
  %v7804 = vpop.permute.xlu0 %7803
  %7805 = vrot.lane.b32.xlu0 %v6389, 72
  %v7806 = vpop.permute.xlu0 %7805
  %7807 = vrot.lane.b32.xlu0 %v6390, 72
  %v7808 = vpop.permute.xlu0 %7807
  %7809 = vrot.lane.b32.xlu0 %v6391, 72
  %v7810 = vpop.permute.xlu0 %7809
  %7811 = vrot.lane.b32.xlu0 %v6396, 72
  %v7812 = vpop.permute.xlu0 %7811
  %7813 = vrot.lane.b32.xlu0 %v6397, 72
  %v7814 = vpop.permute.xlu0 %7813
  %7815 = vrot.lane.b32.xlu0 %v6398, 72
  %v7816 = vpop.permute.xlu0 %7815
  %7817 = vrot.lane.b32.xlu0 %v6399, 72
  %v7818 = vpop.permute.xlu0 %7817
  %7819 = vrot.lane.b32.xlu0 %v6400, 72
  %v7820 = vpop.permute.xlu0 %7819
  %7821 = vrot.lane.b32.xlu0 %v6401, 72
  %v7822 = vpop.permute.xlu0 %7821
  %7823 = vrot.lane.b32.xlu0 %v6402, 72
  %v7824 = vpop.permute.xlu0 %7823
  %7825 = vrot.lane.b32.xlu0 %v6403, 72
  %v7826 = vpop.permute.xlu0 %7825
  %7828 = vrot.lane.b32.xlu0 %v6313, 92
  %v7829 = vpop.permute.xlu0 %7828
  %7830 = vrot.lane.b32.xlu0 %v6314, 92
  %v7831 = vpop.permute.xlu0 %7830
  %7832 = vrot.lane.b32.xlu0 %v6315, 92
  %v7833 = vpop.permute.xlu0 %7832
  %7834 = vrot.lane.b32.xlu0 %v6316, 92
  %v7835 = vpop.permute.xlu0 %7834
  %7836 = vrot.lane.b32.xlu0 %v6317, 92
  %v7837 = vpop.permute.xlu0 %7836
  %7838 = vrot.lane.b32.xlu0 %v6318, 92
  %v7839 = vpop.permute.xlu0 %7838
  %7840 = vrot.lane.b32.xlu0 %v6319, 92
  %v7841 = vpop.permute.xlu0 %7840
  %7842 = vrot.lane.b32.xlu0 %v6320, 92
  %v7843 = vpop.permute.xlu0 %7842
  %7844 = vrot.lane.b32.xlu0 %v6325, 92
  %v7845 = vpop.permute.xlu0 %7844
  %7846 = vrot.lane.b32.xlu0 %v6326, 92
  %v7847 = vpop.permute.xlu0 %7846
  %7848 = vrot.lane.b32.xlu0 %v6327, 92
  %v7849 = vpop.permute.xlu0 %7848
  %7850 = vrot.lane.b32.xlu0 %v6328, 92
  %v7851 = vpop.permute.xlu0 %7850
  %7852 = vrot.lane.b32.xlu0 %v6329, 92
  %v7853 = vpop.permute.xlu0 %7852
  %7854 = vrot.lane.b32.xlu0 %v6330, 92
  %v7855 = vpop.permute.xlu0 %7854
  %7856 = vrot.lane.b32.xlu0 %v6331, 92
  %v7857 = vpop.permute.xlu0 %7856
  %7858 = vrot.lane.b32.xlu0 %v6332, 92
  %v7859 = vpop.permute.xlu0 %7858
  %7860 = vrot.lane.b32.xlu0 %v6337, 92
  %v7861 = vpop.permute.xlu0 %7860
  %7862 = vrot.lane.b32.xlu0 %v6338, 92
  %v7863 = vpop.permute.xlu0 %7862
  %7864 = vrot.lane.b32.xlu0 %v6339, 92
  %v7865 = vpop.permute.xlu0 %7864
  %7866 = vrot.lane.b32.xlu0 %v6340, 92
  %v7867 = vpop.permute.xlu0 %7866
  %7868 = vrot.lane.b32.xlu0 %v6341, 92
  %v7869 = vpop.permute.xlu0 %7868
  %7870 = vrot.lane.b32.xlu0 %v6342, 92
  %v7871 = vpop.permute.xlu0 %7870
  %7872 = vrot.lane.b32.xlu0 %v6343, 92
  %v7873 = vpop.permute.xlu0 %7872
  %7874 = vrot.lane.b32.xlu0 %v6344, 92
  %v7875 = vpop.permute.xlu0 %7874
  %7876 = vrot.lane.b32.xlu0 %v6349, 92
  %v7877 = vpop.permute.xlu0 %7876
  %7878 = vrot.lane.b32.xlu0 %v6350, 92
  %v7879 = vpop.permute.xlu0 %7878
  %7880 = vrot.lane.b32.xlu0 %v6351, 92
  %v7881 = vpop.permute.xlu0 %7880
  %7882 = vrot.lane.b32.xlu0 %v6352, 92
  %v7883 = vpop.permute.xlu0 %7882
  %7884 = vrot.lane.b32.xlu0 %v6353, 92
  %v7885 = vpop.permute.xlu0 %7884
  %7886 = vrot.lane.b32.xlu0 %v6354, 92
  %v7887 = vpop.permute.xlu0 %7886
  %7888 = vrot.lane.b32.xlu0 %v6355, 92
  %v7889 = vpop.permute.xlu0 %7888
  %7890 = vrot.lane.b32.xlu0 %v6356, 92
  %v7891 = vpop.permute.xlu0 %7890
  %7892 = vrot.lane.b32.xlu0 %v6361, 92
  %v7893 = vpop.permute.xlu0 %7892
  %7894 = vrot.lane.b32.xlu0 %v6362, 92
  %v7895 = vpop.permute.xlu0 %7894
  %7896 = vrot.lane.b32.xlu0 %v6363, 92
  %v7897 = vpop.permute.xlu0 %7896
  %7898 = vrot.lane.b32.xlu0 %v6364, 92
  %v7899 = vpop.permute.xlu0 %7898
  %7900 = vrot.lane.b32.xlu0 %v6365, 92
  %v7901 = vpop.permute.xlu0 %7900
  %7902 = vrot.lane.b32.xlu0 %v6366, 92
  %v7903 = vpop.permute.xlu0 %7902
  %7904 = vrot.lane.b32.xlu0 %v6367, 92
  %v7905 = vpop.permute.xlu0 %7904
  %7906 = vrot.lane.b32.xlu0 %v6368, 92
  %v7907 = vpop.permute.xlu0 %7906
  %7908 = vrot.lane.b32.xlu0 %v6373, 92
  %v7909 = vpop.permute.xlu0 %7908
  %7910 = vrot.lane.b32.xlu0 %v6374, 92
  %v7911 = vpop.permute.xlu0 %7910
  %7912 = vrot.lane.b32.xlu0 %v6375, 92
  %v7913 = vpop.permute.xlu0 %7912
  %7914 = vrot.lane.b32.xlu0 %v6376, 92
  %v7915 = vpop.permute.xlu0 %7914
  %7916 = vrot.lane.b32.xlu0 %v6377, 92
  %v7917 = vpop.permute.xlu0 %7916
  %7918 = vrot.lane.b32.xlu0 %v6378, 92
  %v7919 = vpop.permute.xlu0 %7918
  %7920 = vrot.lane.b32.xlu0 %v6379, 92
  %v7921 = vpop.permute.xlu0 %7920
  %7922 = vrot.lane.b32.xlu0 %v6380, 92
  %v7923 = vpop.permute.xlu0 %7922
  %7924 = vrot.lane.b32.xlu0 %v6385, 92
  %v7925 = vpop.permute.xlu0 %7924
  %7926 = vrot.lane.b32.xlu0 %v6386, 92
  %v7927 = vpop.permute.xlu0 %7926
  %7928 = vrot.lane.b32.xlu0 %v6387, 92
  %v7929 = vpop.permute.xlu0 %7928
  %7930 = vrot.lane.b32.xlu0 %v6388, 92
  %v7931 = vpop.permute.xlu0 %7930
  %7932 = vrot.lane.b32.xlu0 %v6389, 92
  %v7933 = vpop.permute.xlu0 %7932
  %7934 = vrot.lane.b32.xlu0 %v6390, 92
  %v7935 = vpop.permute.xlu0 %7934
  %7936 = vrot.lane.b32.xlu0 %v6391, 92
  %v7937 = vpop.permute.xlu0 %7936
  %7938 = vrot.lane.b32.xlu0 %v6392, 92
  %v7939 = vpop.permute.xlu0 %7938
  %7940 = vrot.lane.b32.xlu0 %v6397, 92
  %v7941 = vpop.permute.xlu0 %7940
  %7942 = vrot.lane.b32.xlu0 %v6398, 92
  %v7943 = vpop.permute.xlu0 %7942
  %7944 = vrot.lane.b32.xlu0 %v6399, 92
  %v7945 = vpop.permute.xlu0 %7944
  %7946 = vrot.lane.b32.xlu0 %v6400, 92
  %v7947 = vpop.permute.xlu0 %7946
  %7948 = vrot.lane.b32.xlu0 %v6401, 92
  %v7949 = vpop.permute.xlu0 %7948
  %7950 = vrot.lane.b32.xlu0 %v6402, 92
  %v7951 = vpop.permute.xlu0 %7950
  %7952 = vrot.lane.b32.xlu0 %v6403, 92
  %v7953 = vpop.permute.xlu0 %7952
  %7954 = vrot.lane.b32.xlu0 %v6404, 92
  %v7955 = vpop.permute.xlu0 %7954
  %7957 = vrot.lane.b32.xlu0 %v6314, 112
  %v7958 = vpop.permute.xlu0 %7957
  %7959 = vrot.lane.b32.xlu0 %v6315, 112
  %v7960 = vpop.permute.xlu0 %7959
  %7961 = vrot.lane.b32.xlu0 %v6316, 112
  %v7962 = vpop.permute.xlu0 %7961
  %7963 = vrot.lane.b32.xlu0 %v6317, 112
  %v7964 = vpop.permute.xlu0 %7963
  %7965 = vrot.lane.b32.xlu0 %v6318, 112
  %v7966 = vpop.permute.xlu0 %7965
  %7967 = vrot.lane.b32.xlu0 %v6319, 112
  %v7968 = vpop.permute.xlu0 %7967
  %7969 = vrot.lane.b32.xlu0 %v6320, 112
  %v7970 = vpop.permute.xlu0 %7969
  %7971 = vrot.lane.b32.xlu0 %v6321, 112
  %v7972 = vpop.permute.xlu0 %7971
  %7973 = vrot.lane.b32.xlu0 %v6326, 112
  %v7974 = vpop.permute.xlu0 %7973
  %7975 = vrot.lane.b32.xlu0 %v6327, 112
  %v7976 = vpop.permute.xlu0 %7975
  %7977 = vrot.lane.b32.xlu0 %v6328, 112
  %v7978 = vpop.permute.xlu0 %7977
  %7979 = vrot.lane.b32.xlu0 %v6329, 112
  %v7980 = vpop.permute.xlu0 %7979
  %7981 = vrot.lane.b32.xlu0 %v6330, 112
  %v7982 = vpop.permute.xlu0 %7981
  %7983 = vrot.lane.b32.xlu0 %v6331, 112
  %v7984 = vpop.permute.xlu0 %7983
  %7985 = vrot.lane.b32.xlu0 %v6332, 112
  %v7986 = vpop.permute.xlu0 %7985
  %7987 = vrot.lane.b32.xlu0 %v6333, 112
  %v7988 = vpop.permute.xlu0 %7987
  %7989 = vrot.lane.b32.xlu0 %v6338, 112
  %v7990 = vpop.permute.xlu0 %7989
  %7991 = vrot.lane.b32.xlu0 %v6339, 112
  %v7992 = vpop.permute.xlu0 %7991
  %7993 = vrot.lane.b32.xlu0 %v6340, 112
  %v7994 = vpop.permute.xlu0 %7993
  %7995 = vrot.lane.b32.xlu0 %v6341, 112
  %v7996 = vpop.permute.xlu0 %7995
  %7997 = vrot.lane.b32.xlu0 %v6342, 112
  %v7998 = vpop.permute.xlu0 %7997
  %7999 = vrot.lane.b32.xlu0 %v6343, 112
  %v8000 = vpop.permute.xlu0 %7999
  %8001 = vrot.lane.b32.xlu0 %v6344, 112
  %v8002 = vpop.permute.xlu0 %8001
  %8003 = vrot.lane.b32.xlu0 %v6345, 112
  %v8004 = vpop.permute.xlu0 %8003
  %8005 = vrot.lane.b32.xlu0 %v6350, 112
  %v8006 = vpop.permute.xlu0 %8005
  %8007 = vrot.lane.b32.xlu0 %v6351, 112
  %v8008 = vpop.permute.xlu0 %8007
  %8009 = vrot.lane.b32.xlu0 %v6352, 112
  %v8010 = vpop.permute.xlu0 %8009
  %8011 = vrot.lane.b32.xlu0 %v6353, 112
  %v8012 = vpop.permute.xlu0 %8011
  %8013 = vrot.lane.b32.xlu0 %v6354, 112
  %v8014 = vpop.permute.xlu0 %8013
  %8015 = vrot.lane.b32.xlu0 %v6355, 112
  %v8016 = vpop.permute.xlu0 %8015
  %8017 = vrot.lane.b32.xlu0 %v6356, 112
  %v8018 = vpop.permute.xlu0 %8017
  %8019 = vrot.lane.b32.xlu0 %v6357, 112
  %v8020 = vpop.permute.xlu0 %8019
  %8021 = vrot.lane.b32.xlu0 %v6362, 112
  %v8022 = vpop.permute.xlu0 %8021
  %8023 = vrot.lane.b32.xlu0 %v6363, 112
  %v8024 = vpop.permute.xlu0 %8023
  %8025 = vrot.lane.b32.xlu0 %v6364, 112
  %v8026 = vpop.permute.xlu0 %8025
  %8027 = vrot.lane.b32.xlu0 %v6365, 112
  %v8028 = vpop.permute.xlu0 %8027
  %8029 = vrot.lane.b32.xlu0 %v6366, 112
  %v8030 = vpop.permute.xlu0 %8029
  %8031 = vrot.lane.b32.xlu0 %v6367, 112
  %v8032 = vpop.permute.xlu0 %8031
  %8033 = vrot.lane.b32.xlu0 %v6368, 112
  %v8034 = vpop.permute.xlu0 %8033
  %8035 = vrot.lane.b32.xlu0 %v6369, 112
  %v8036 = vpop.permute.xlu0 %8035
  %8037 = vrot.lane.b32.xlu0 %v6374, 112
  %v8038 = vpop.permute.xlu0 %8037
  %8039 = vrot.lane.b32.xlu0 %v6375, 112
  %v8040 = vpop.permute.xlu0 %8039
  %8041 = vrot.lane.b32.xlu0 %v6376, 112
  %v8042 = vpop.permute.xlu0 %8041
  %8043 = vrot.lane.b32.xlu0 %v6377, 112
  %v8044 = vpop.permute.xlu0 %8043
  %8045 = vrot.lane.b32.xlu0 %v6378, 112
  %v8046 = vpop.permute.xlu0 %8045
  %8047 = vrot.lane.b32.xlu0 %v6379, 112
  %v8048 = vpop.permute.xlu0 %8047
  %8049 = vrot.lane.b32.xlu0 %v6380, 112
  %v8050 = vpop.permute.xlu0 %8049
  %8051 = vrot.lane.b32.xlu0 %v6381, 112
  %v8052 = vpop.permute.xlu0 %8051
  %8053 = vrot.lane.b32.xlu0 %v6386, 112
  %v8054 = vpop.permute.xlu0 %8053
  %8055 = vrot.lane.b32.xlu0 %v6387, 112
  %v8056 = vpop.permute.xlu0 %8055
  %8057 = vrot.lane.b32.xlu0 %v6388, 112
  %v8058 = vpop.permute.xlu0 %8057
  %8059 = vrot.lane.b32.xlu0 %v6389, 112
  %v8060 = vpop.permute.xlu0 %8059
  %8061 = vrot.lane.b32.xlu0 %v6390, 112
  %v8062 = vpop.permute.xlu0 %8061
  %8063 = vrot.lane.b32.xlu0 %v6391, 112
  %v8064 = vpop.permute.xlu0 %8063
  %8065 = vrot.lane.b32.xlu0 %v6392, 112
  %v8066 = vpop.permute.xlu0 %8065
  %8067 = vrot.lane.b32.xlu0 %v6393, 112
  %v8068 = vpop.permute.xlu0 %8067
  %8069 = vrot.lane.b32.xlu0 %v6398, 112
  %v8070 = vpop.permute.xlu0 %8069
  %8071 = vrot.lane.b32.xlu0 %v6399, 112
  %v8072 = vpop.permute.xlu0 %8071
  %8073 = vrot.lane.b32.xlu0 %v6400, 112
  %v8074 = vpop.permute.xlu0 %8073
  %8075 = vrot.lane.b32.xlu0 %v6401, 112
  %v8076 = vpop.permute.xlu0 %8075
  %8077 = vrot.lane.b32.xlu0 %v6402, 112
  %v8078 = vpop.permute.xlu0 %8077
  %8079 = vrot.lane.b32.xlu0 %v6403, 112
  %v8080 = vpop.permute.xlu0 %8079
  %8081 = vrot.lane.b32.xlu0 %v6404, 112
  %v8082 = vpop.permute.xlu0 %8081
  %8083 = vrot.lane.b32.xlu0 %v6405, 112
  %v8084 = vpop.permute.xlu0 %8083
  %8086 = vrot.lane.b32.xlu0 %v6315, 4
  %v8087 = vpop.permute.xlu0 %8086
  %8088 = vrot.lane.b32.xlu0 %v6316, 4
  %v8089 = vpop.permute.xlu0 %8088
  %8090 = vrot.lane.b32.xlu0 %v6317, 4
  %v8091 = vpop.permute.xlu0 %8090
  %8092 = vrot.lane.b32.xlu0 %v6318, 4
  %v8093 = vpop.permute.xlu0 %8092
  %8094 = vrot.lane.b32.xlu0 %v6319, 4
  %v8095 = vpop.permute.xlu0 %8094
  %8096 = vrot.lane.b32.xlu0 %v6320, 4
  %v8097 = vpop.permute.xlu0 %8096
  %8098 = vrot.lane.b32.xlu0 %v6321, 4
  %v8099 = vpop.permute.xlu0 %8098
  %8100 = vrot.lane.b32.xlu0 %v6322, 4
  %v8101 = vpop.permute.xlu0 %8100
  %8102 = vrot.lane.b32.xlu0 %v6327, 4
  %v8103 = vpop.permute.xlu0 %8102
  %8104 = vrot.lane.b32.xlu0 %v6328, 4
  %v8105 = vpop.permute.xlu0 %8104
  %8106 = vrot.lane.b32.xlu0 %v6329, 4
  %v8107 = vpop.permute.xlu0 %8106
  %8108 = vrot.lane.b32.xlu0 %v6330, 4
  %v8109 = vpop.permute.xlu0 %8108
  %8110 = vrot.lane.b32.xlu0 %v6331, 4
  %v8111 = vpop.permute.xlu0 %8110
  %8112 = vrot.lane.b32.xlu0 %v6332, 4
  %v8113 = vpop.permute.xlu0 %8112
  %8114 = vrot.lane.b32.xlu0 %v6333, 4
  %v8115 = vpop.permute.xlu0 %8114
  %8116 = vrot.lane.b32.xlu0 %v6334, 4
  %v8117 = vpop.permute.xlu0 %8116
  %8118 = vrot.lane.b32.xlu0 %v6339, 4
  %v8119 = vpop.permute.xlu0 %8118
  %8120 = vrot.lane.b32.xlu0 %v6340, 4
  %v8121 = vpop.permute.xlu0 %8120
  %8122 = vrot.lane.b32.xlu0 %v6341, 4
  %v8123 = vpop.permute.xlu0 %8122
  %8124 = vrot.lane.b32.xlu0 %v6342, 4
  %v8125 = vpop.permute.xlu0 %8124
  %8126 = vrot.lane.b32.xlu0 %v6343, 4
  %v8127 = vpop.permute.xlu0 %8126
  %8128 = vrot.lane.b32.xlu0 %v6344, 4
  %v8129 = vpop.permute.xlu0 %8128
  %8130 = vrot.lane.b32.xlu0 %v6345, 4
  %v8131 = vpop.permute.xlu0 %8130
  %8132 = vrot.lane.b32.xlu0 %v6346, 4
  %v8133 = vpop.permute.xlu0 %8132
  %8134 = vrot.lane.b32.xlu0 %v6351, 4
  %v8135 = vpop.permute.xlu0 %8134
  %8136 = vrot.lane.b32.xlu0 %v6352, 4
  %v8137 = vpop.permute.xlu0 %8136
  %8138 = vrot.lane.b32.xlu0 %v6353, 4
  %v8139 = vpop.permute.xlu0 %8138
  %8140 = vrot.lane.b32.xlu0 %v6354, 4
  %v8141 = vpop.permute.xlu0 %8140
  %8142 = vrot.lane.b32.xlu0 %v6355, 4
  %v8143 = vpop.permute.xlu0 %8142
  %8144 = vrot.lane.b32.xlu0 %v6356, 4
  %v8145 = vpop.permute.xlu0 %8144
  %8146 = vrot.lane.b32.xlu0 %v6357, 4
  %v8147 = vpop.permute.xlu0 %8146
  %8148 = vrot.lane.b32.xlu0 %v6358, 4
  %v8149 = vpop.permute.xlu0 %8148
  %8150 = vrot.lane.b32.xlu0 %v6363, 4
  %v8151 = vpop.permute.xlu0 %8150
  %8152 = vrot.lane.b32.xlu0 %v6364, 4
  %v8153 = vpop.permute.xlu0 %8152
  %8154 = vrot.lane.b32.xlu0 %v6365, 4
  %v8155 = vpop.permute.xlu0 %8154
  %8156 = vrot.lane.b32.xlu0 %v6366, 4
  %v8157 = vpop.permute.xlu0 %8156
  %8158 = vrot.lane.b32.xlu0 %v6367, 4
  %v8159 = vpop.permute.xlu0 %8158
  %8160 = vrot.lane.b32.xlu0 %v6368, 4
  %v8161 = vpop.permute.xlu0 %8160
  %8162 = vrot.lane.b32.xlu0 %v6369, 4
  %v8163 = vpop.permute.xlu0 %8162
  %8164 = vrot.lane.b32.xlu0 %v6370, 4
  %v8165 = vpop.permute.xlu0 %8164
  %8166 = vrot.lane.b32.xlu0 %v6375, 4
  %v8167 = vpop.permute.xlu0 %8166
  %8168 = vrot.lane.b32.xlu0 %v6376, 4
  %v8169 = vpop.permute.xlu0 %8168
  %8170 = vrot.lane.b32.xlu0 %v6377, 4
  %v8171 = vpop.permute.xlu0 %8170
  %8172 = vrot.lane.b32.xlu0 %v6378, 4
  %v8173 = vpop.permute.xlu0 %8172
  %8174 = vrot.lane.b32.xlu0 %v6379, 4
  %v8175 = vpop.permute.xlu0 %8174
  %8176 = vrot.lane.b32.xlu0 %v6380, 4
  %v8177 = vpop.permute.xlu0 %8176
  %8178 = vrot.lane.b32.xlu0 %v6381, 4
  %v8179 = vpop.permute.xlu0 %8178
  %8180 = vrot.lane.b32.xlu0 %v6382, 4
  %v8181 = vpop.permute.xlu0 %8180
  %8182 = vrot.lane.b32.xlu0 %v6387, 4
  %v8183 = vpop.permute.xlu0 %8182
  %8184 = vrot.lane.b32.xlu0 %v6388, 4
  %v8185 = vpop.permute.xlu0 %8184
  %8186 = vrot.lane.b32.xlu0 %v6389, 4
  %v8187 = vpop.permute.xlu0 %8186
  %8188 = vrot.lane.b32.xlu0 %v6390, 4
  %v8189 = vpop.permute.xlu0 %8188
  %8190 = vrot.lane.b32.xlu0 %v6391, 4
  %v8191 = vpop.permute.xlu0 %8190
  %8192 = vrot.lane.b32.xlu0 %v6392, 4
  %v8193 = vpop.permute.xlu0 %8192
  %8194 = vrot.lane.b32.xlu0 %v6393, 4
  %v8195 = vpop.permute.xlu0 %8194
  %8196 = vrot.lane.b32.xlu0 %v6394, 4
  %v8197 = vpop.permute.xlu0 %8196
  %8198 = vrot.lane.b32.xlu0 %v6399, 4
  %v8199 = vpop.permute.xlu0 %8198
  %8200 = vrot.lane.b32.xlu0 %v6400, 4
  %v8201 = vpop.permute.xlu0 %8200
  %8202 = vrot.lane.b32.xlu0 %v6401, 4
  %v8203 = vpop.permute.xlu0 %8202
  %8204 = vrot.lane.b32.xlu0 %v6402, 4
  %v8205 = vpop.permute.xlu0 %8204
  %8206 = vrot.lane.b32.xlu0 %v6403, 4
  %v8207 = vpop.permute.xlu0 %8206
  %8208 = vrot.lane.b32.xlu0 %v6404, 4
  %v8209 = vpop.permute.xlu0 %8208
  %8210 = vrot.lane.b32.xlu0 %v6405, 4
  %v8211 = vpop.permute.xlu0 %8210
  %8212 = vrot.lane.b32.xlu0 %v6406, 4
  %v8213 = vpop.permute.xlu0 %8212
  %8215 = vrot.lane.b32.xlu0 %v6316, 24
  %v8216 = vpop.permute.xlu0 %8215
  %8217 = vrot.lane.b32.xlu0 %v6317, 24
  %v8218 = vpop.permute.xlu0 %8217
  %8219 = vrot.lane.b32.xlu0 %v6318, 24
  %v8220 = vpop.permute.xlu0 %8219
  %8221 = vrot.lane.b32.xlu0 %v6319, 24
  %v8222 = vpop.permute.xlu0 %8221
  %8223 = vrot.lane.b32.xlu0 %v6320, 24
  %v8224 = vpop.permute.xlu0 %8223
  %8225 = vrot.lane.b32.xlu0 %v6321, 24
  %v8226 = vpop.permute.xlu0 %8225
  %8227 = vrot.lane.b32.xlu0 %v6322, 24
  %v8228 = vpop.permute.xlu0 %8227
  %8229 = vrot.lane.b32.xlu0 %v6323, 24
  %v8230 = vpop.permute.xlu0 %8229
  %8231 = vrot.lane.b32.xlu0 %v6328, 24
  %v8232 = vpop.permute.xlu0 %8231
  %8233 = vrot.lane.b32.xlu0 %v6329, 24
  %v8234 = vpop.permute.xlu0 %8233
  %8235 = vrot.lane.b32.xlu0 %v6330, 24
  %v8236 = vpop.permute.xlu0 %8235
  %8237 = vrot.lane.b32.xlu0 %v6331, 24
  %v8238 = vpop.permute.xlu0 %8237
  %8239 = vrot.lane.b32.xlu0 %v6332, 24
  %v8240 = vpop.permute.xlu0 %8239
  %8241 = vrot.lane.b32.xlu0 %v6333, 24
  %v8242 = vpop.permute.xlu0 %8241
  %8243 = vrot.lane.b32.xlu0 %v6334, 24
  %v8244 = vpop.permute.xlu0 %8243
  %8245 = vrot.lane.b32.xlu0 %v6335, 24
  %v8246 = vpop.permute.xlu0 %8245
  %8247 = vrot.lane.b32.xlu0 %v6340, 24
  %v8248 = vpop.permute.xlu0 %8247
  %8249 = vrot.lane.b32.xlu0 %v6341, 24
  %v8250 = vpop.permute.xlu0 %8249
  %8251 = vrot.lane.b32.xlu0 %v6342, 24
  %v8252 = vpop.permute.xlu0 %8251
  %8253 = vrot.lane.b32.xlu0 %v6343, 24
  %v8254 = vpop.permute.xlu0 %8253
  %8255 = vrot.lane.b32.xlu0 %v6344, 24
  %v8256 = vpop.permute.xlu0 %8255
  %8257 = vrot.lane.b32.xlu0 %v6345, 24
  %v8258 = vpop.permute.xlu0 %8257
  %8259 = vrot.lane.b32.xlu0 %v6346, 24
  %v8260 = vpop.permute.xlu0 %8259
  %8261 = vrot.lane.b32.xlu0 %v6347, 24
  %v8262 = vpop.permute.xlu0 %8261
  %8263 = vrot.lane.b32.xlu0 %v6352, 24
  %v8264 = vpop.permute.xlu0 %8263
  %8265 = vrot.lane.b32.xlu0 %v6353, 24
  %v8266 = vpop.permute.xlu0 %8265
  %8267 = vrot.lane.b32.xlu0 %v6354, 24
  %v8268 = vpop.permute.xlu0 %8267
  %8269 = vrot.lane.b32.xlu0 %v6355, 24
  %v8270 = vpop.permute.xlu0 %8269
  %8271 = vrot.lane.b32.xlu0 %v6356, 24
  %v8272 = vpop.permute.xlu0 %8271
  %8273 = vrot.lane.b32.xlu0 %v6357, 24
  %v8274 = vpop.permute.xlu0 %8273
  %8275 = vrot.lane.b32.xlu0 %v6358, 24
  %v8276 = vpop.permute.xlu0 %8275
  %8277 = vrot.lane.b32.xlu0 %v6359, 24
  %v8278 = vpop.permute.xlu0 %8277
  %8279 = vrot.lane.b32.xlu0 %v6364, 24
  %v8280 = vpop.permute.xlu0 %8279
  %8281 = vrot.lane.b32.xlu0 %v6365, 24
  %v8282 = vpop.permute.xlu0 %8281
  %8283 = vrot.lane.b32.xlu0 %v6366, 24
  %v8284 = vpop.permute.xlu0 %8283
  %8285 = vrot.lane.b32.xlu0 %v6367, 24
  %v8286 = vpop.permute.xlu0 %8285
  %8287 = vrot.lane.b32.xlu0 %v6368, 24
  %v8288 = vpop.permute.xlu0 %8287
  %8289 = vrot.lane.b32.xlu0 %v6369, 24
  %v8290 = vpop.permute.xlu0 %8289
  %8291 = vrot.lane.b32.xlu0 %v6370, 24
  %v8292 = vpop.permute.xlu0 %8291
  %8293 = vrot.lane.b32.xlu0 %v6371, 24
  %v8294 = vpop.permute.xlu0 %8293
  %8295 = vrot.lane.b32.xlu0 %v6376, 24
  %v8296 = vpop.permute.xlu0 %8295
  %8297 = vrot.lane.b32.xlu0 %v6377, 24
  %v8298 = vpop.permute.xlu0 %8297
  %8299 = vrot.lane.b32.xlu0 %v6378, 24
  %v8300 = vpop.permute.xlu0 %8299
  %8301 = vrot.lane.b32.xlu0 %v6379, 24
  %v8302 = vpop.permute.xlu0 %8301
  %8303 = vrot.lane.b32.xlu0 %v6380, 24
  %v8304 = vpop.permute.xlu0 %8303
  %8305 = vrot.lane.b32.xlu0 %v6381, 24
  %v8306 = vpop.permute.xlu0 %8305
  %8307 = vrot.lane.b32.xlu0 %v6382, 24
  %v8308 = vpop.permute.xlu0 %8307
  %8309 = vrot.lane.b32.xlu0 %v6383, 24
  %v8310 = vpop.permute.xlu0 %8309
  %8311 = vrot.lane.b32.xlu0 %v6388, 24
  %v8312 = vpop.permute.xlu0 %8311
  %8313 = vrot.lane.b32.xlu0 %v6389, 24
  %v8314 = vpop.permute.xlu0 %8313
  %8315 = vrot.lane.b32.xlu0 %v6390, 24
  %v8316 = vpop.permute.xlu0 %8315
  %8317 = vrot.lane.b32.xlu0 %v6391, 24
  %v8318 = vpop.permute.xlu0 %8317
  %8319 = vrot.lane.b32.xlu0 %v6392, 24
  %v8320 = vpop.permute.xlu0 %8319
  %8321 = vrot.lane.b32.xlu0 %v6393, 24
  %v8322 = vpop.permute.xlu0 %8321
  %8323 = vrot.lane.b32.xlu0 %v6394, 24
  %v8324 = vpop.permute.xlu0 %8323
  %8325 = vrot.lane.b32.xlu0 %v6395, 24
  %v8326 = vpop.permute.xlu0 %8325
  %8327 = vrot.lane.b32.xlu0 %v6400, 24
  %v8328 = vpop.permute.xlu0 %8327
  %8329 = vrot.lane.b32.xlu0 %v6401, 24
  %v8330 = vpop.permute.xlu0 %8329
  %8331 = vrot.lane.b32.xlu0 %v6402, 24
  %v8332 = vpop.permute.xlu0 %8331
  %8333 = vrot.lane.b32.xlu0 %v6403, 24
  %v8334 = vpop.permute.xlu0 %8333
  %8335 = vrot.lane.b32.xlu0 %v6404, 24
  %v8336 = vpop.permute.xlu0 %8335
  %8337 = vrot.lane.b32.xlu0 %v6405, 24
  %v8338 = vpop.permute.xlu0 %8337
  %8339 = vrot.lane.b32.xlu0 %v6406, 24
  %v8340 = vpop.permute.xlu0 %8339
  %8341 = vrot.lane.b32.xlu0 %v6407, 24
  %v8342 = vpop.permute.xlu0 %8341
  %8351 = vrot.lane.b32.xlu0 %v6324, 44
  %v8352 = vpop.permute.xlu0 %8351
  %8353 = vrot.lane.b32.xlu0 %v6325, 44
  %v8354 = vpop.permute.xlu0 %8353
  %8355 = vrot.lane.b32.xlu0 %v6326, 44
  %v8356 = vpop.permute.xlu0 %8355
  %8357 = vrot.lane.b32.xlu0 %v6327, 44
  %v8358 = vpop.permute.xlu0 %8357
  %8359 = vrot.lane.b32.xlu0 %v6328, 44
  %v8360 = vpop.permute.xlu0 %8359
  %8361 = vrot.lane.b32.xlu0 %v6329, 44
  %v8362 = vpop.permute.xlu0 %8361
  %8363 = vrot.lane.b32.xlu0 %v6330, 44
  %v8364 = vpop.permute.xlu0 %8363
  %8365 = vrot.lane.b32.xlu0 %v6331, 44
  %v8366 = vpop.permute.xlu0 %8365
  %8367 = vrot.lane.b32.xlu0 %v6336, 44
  %v8368 = vpop.permute.xlu0 %8367
  %8369 = vrot.lane.b32.xlu0 %v6337, 44
  %v8370 = vpop.permute.xlu0 %8369
  %8371 = vrot.lane.b32.xlu0 %v6338, 44
  %v8372 = vpop.permute.xlu0 %8371
  %8373 = vrot.lane.b32.xlu0 %v6339, 44
  %v8374 = vpop.permute.xlu0 %8373
  %8375 = vrot.lane.b32.xlu0 %v6340, 44
  %v8376 = vpop.permute.xlu0 %8375
  %8377 = vrot.lane.b32.xlu0 %v6341, 44
  %v8378 = vpop.permute.xlu0 %8377
  %8379 = vrot.lane.b32.xlu0 %v6342, 44
  %v8380 = vpop.permute.xlu0 %8379
  %8381 = vrot.lane.b32.xlu0 %v6343, 44
  %v8382 = vpop.permute.xlu0 %8381
  %8383 = vrot.lane.b32.xlu0 %v6348, 44
  %v8384 = vpop.permute.xlu0 %8383
  %8385 = vrot.lane.b32.xlu0 %v6349, 44
  %v8386 = vpop.permute.xlu0 %8385
  %8387 = vrot.lane.b32.xlu0 %v6350, 44
  %v8388 = vpop.permute.xlu0 %8387
  %8389 = vrot.lane.b32.xlu0 %v6351, 44
  %v8390 = vpop.permute.xlu0 %8389
  %8391 = vrot.lane.b32.xlu0 %v6352, 44
  %v8392 = vpop.permute.xlu0 %8391
  %8393 = vrot.lane.b32.xlu0 %v6353, 44
  %v8394 = vpop.permute.xlu0 %8393
  %8395 = vrot.lane.b32.xlu0 %v6354, 44
  %v8396 = vpop.permute.xlu0 %8395
  %8397 = vrot.lane.b32.xlu0 %v6355, 44
  %v8398 = vpop.permute.xlu0 %8397
  %8399 = vrot.lane.b32.xlu0 %v6360, 44
  %v8400 = vpop.permute.xlu0 %8399
  %8401 = vrot.lane.b32.xlu0 %v6361, 44
  %v8402 = vpop.permute.xlu0 %8401
  %8403 = vrot.lane.b32.xlu0 %v6362, 44
  %v8404 = vpop.permute.xlu0 %8403
  %8405 = vrot.lane.b32.xlu0 %v6363, 44
  %v8406 = vpop.permute.xlu0 %8405
  %8407 = vrot.lane.b32.xlu0 %v6364, 44
  %v8408 = vpop.permute.xlu0 %8407
  %8409 = vrot.lane.b32.xlu0 %v6365, 44
  %v8410 = vpop.permute.xlu0 %8409
  %8411 = vrot.lane.b32.xlu0 %v6366, 44
  %v8412 = vpop.permute.xlu0 %8411
  %8413 = vrot.lane.b32.xlu0 %v6367, 44
  %v8414 = vpop.permute.xlu0 %8413
  %8415 = vrot.lane.b32.xlu0 %v6372, 44
  %v8416 = vpop.permute.xlu0 %8415
  %8417 = vrot.lane.b32.xlu0 %v6373, 44
  %v8418 = vpop.permute.xlu0 %8417
  %8419 = vrot.lane.b32.xlu0 %v6374, 44
  %v8420 = vpop.permute.xlu0 %8419
  %8421 = vrot.lane.b32.xlu0 %v6375, 44
  %v8422 = vpop.permute.xlu0 %8421
  %8423 = vrot.lane.b32.xlu0 %v6376, 44
  %v8424 = vpop.permute.xlu0 %8423
  %8425 = vrot.lane.b32.xlu0 %v6377, 44
  %v8426 = vpop.permute.xlu0 %8425
  %8427 = vrot.lane.b32.xlu0 %v6378, 44
  %v8428 = vpop.permute.xlu0 %8427
  %8429 = vrot.lane.b32.xlu0 %v6379, 44
  %v8430 = vpop.permute.xlu0 %8429
  %8431 = vrot.lane.b32.xlu0 %v6384, 44
  %v8432 = vpop.permute.xlu0 %8431
  %8433 = vrot.lane.b32.xlu0 %v6385, 44
  %v8434 = vpop.permute.xlu0 %8433
  %8435 = vrot.lane.b32.xlu0 %v6386, 44
  %v8436 = vpop.permute.xlu0 %8435
  %8437 = vrot.lane.b32.xlu0 %v6387, 44
  %v8438 = vpop.permute.xlu0 %8437
  %8439 = vrot.lane.b32.xlu0 %v6388, 44
  %v8440 = vpop.permute.xlu0 %8439
  %8441 = vrot.lane.b32.xlu0 %v6389, 44
  %v8442 = vpop.permute.xlu0 %8441
  %8443 = vrot.lane.b32.xlu0 %v6390, 44
  %v8444 = vpop.permute.xlu0 %8443
  %8445 = vrot.lane.b32.xlu0 %v6391, 44
  %v8446 = vpop.permute.xlu0 %8445
  %8447 = vrot.lane.b32.xlu0 %v6396, 44
  %v8448 = vpop.permute.xlu0 %8447
  %8449 = vrot.lane.b32.xlu0 %v6397, 44
  %v8450 = vpop.permute.xlu0 %8449
  %8451 = vrot.lane.b32.xlu0 %v6398, 44
  %v8452 = vpop.permute.xlu0 %8451
  %8453 = vrot.lane.b32.xlu0 %v6399, 44
  %v8454 = vpop.permute.xlu0 %8453
  %8455 = vrot.lane.b32.xlu0 %v6400, 44
  %v8456 = vpop.permute.xlu0 %8455
  %8457 = vrot.lane.b32.xlu0 %v6401, 44
  %v8458 = vpop.permute.xlu0 %8457
  %8459 = vrot.lane.b32.xlu0 %v6402, 44
  %v8460 = vpop.permute.xlu0 %8459
  %8461 = vrot.lane.b32.xlu0 %v6403, 44
  %v8462 = vpop.permute.xlu0 %8461
  %8463 = vrot.lane.b32.xlu0 %v6408, 44
  %v8464 = vpop.permute.xlu0 %8463
  %8465 = vrot.lane.b32.xlu0 %v6409, 44
  %v8466 = vpop.permute.xlu0 %8465
  %8467 = vrot.lane.b32.xlu0 %v6410, 44
  %v8468 = vpop.permute.xlu0 %8467
  %8469 = vrot.lane.b32.xlu0 %v6411, 44
  %v8470 = vpop.permute.xlu0 %8469
  %8471 = vrot.lane.b32.xlu0 %v6412, 44
  %v8472 = vpop.permute.xlu0 %8471
  %8473 = vrot.lane.b32.xlu0 %v6413, 44
  %v8474 = vpop.permute.xlu0 %8473
  %8475 = vrot.lane.b32.xlu0 %v6414, 44
  %v8476 = vpop.permute.xlu0 %8475
  %8477 = vrot.lane.b32.xlu0 %v6415, 44
  %v8478 = vpop.permute.xlu0 %8477
  %vm8479 = vcmask 162816
  %v8482 = vsel %vm8479, %v6288, %v6497
  %v8485 = vsel %vm8479, %v6289, %v6499
  %v8488 = vsel %vm8479, %v6290, %v6501
  %v8491 = vsel %vm8479, %v6291, %v6503
  %v8494 = vsel %vm8479, %v6292, %v6505
  %v8497 = vsel %vm8479, %v6293, %v6507
  %v8500 = vsel %vm8479, %v6294, %v6509
  %v8503 = vsel %vm8479, %v6295, %v6511
  %v8506 = vsel %vm8479, %v6300, %v6513
  %v8509 = vsel %vm8479, %v6301, %v6515
  %v8512 = vsel %vm8479, %v6302, %v6517
  %v8515 = vsel %vm8479, %v6303, %v6519
  %v8518 = vsel %vm8479, %v6304, %v6521
  %v8521 = vsel %vm8479, %v6305, %v6523
  %v8524 = vsel %vm8479, %v6306, %v6525
  %v8527 = vsel %vm8479, %v6307, %v6527
  %v8530 = vsel %vm8479, %v6312, %v6529
  %v8533 = vsel %vm8479, %v6313, %v6531
  %v8536 = vsel %vm8479, %v6314, %v6533
  %v8539 = vsel %vm8479, %v6315, %v6535
  %v8542 = vsel %vm8479, %v6316, %v6537
  %v8545 = vsel %vm8479, %v6317, %v6539
  %v8548 = vsel %vm8479, %v6318, %v6541
  %v8551 = vsel %vm8479, %v6319, %v6543
  %v8554 = vsel %vm8479, %v6324, %v6545
  %v8557 = vsel %vm8479, %v6325, %v6547
  %v8560 = vsel %vm8479, %v6326, %v6549
  %v8563 = vsel %vm8479, %v6327, %v6551
  %v8566 = vsel %vm8479, %v6328, %v6553
  %v8569 = vsel %vm8479, %v6329, %v6555
  %v8572 = vsel %vm8479, %v6330, %v6557
  %v8575 = vsel %vm8479, %v6331, %v6559
  %v8578 = vsel %vm8479, %v6336, %v6561
  %v8581 = vsel %vm8479, %v6337, %v6563
  %v8584 = vsel %vm8479, %v6338, %v6565
  %v8587 = vsel %vm8479, %v6339, %v6567
  %v8590 = vsel %vm8479, %v6340, %v6569
  %v8593 = vsel %vm8479, %v6341, %v6571
  %v8596 = vsel %vm8479, %v6342, %v6573
  %v8599 = vsel %vm8479, %v6343, %v6575
  %v8602 = vsel %vm8479, %v6348, %v6577
  %v8605 = vsel %vm8479, %v6349, %v6579
  %v8608 = vsel %vm8479, %v6350, %v6581
  %v8611 = vsel %vm8479, %v6351, %v6583
  %v8614 = vsel %vm8479, %v6352, %v6585
  %v8617 = vsel %vm8479, %v6353, %v6587
  %v8620 = vsel %vm8479, %v6354, %v6589
  %v8623 = vsel %vm8479, %v6355, %v6591
  %v8626 = vsel %vm8479, %v6360, %v6593
  %v8629 = vsel %vm8479, %v6361, %v6595
  %v8632 = vsel %vm8479, %v6362, %v6597
  %v8635 = vsel %vm8479, %v6363, %v6599
  %v8638 = vsel %vm8479, %v6364, %v6601
  %v8641 = vsel %vm8479, %v6365, %v6603
  %v8644 = vsel %vm8479, %v6366, %v6605
  %v8647 = vsel %vm8479, %v6367, %v6607
  %v8650 = vsel %vm8479, %v6372, %v6609
  %v8653 = vsel %vm8479, %v6373, %v6611
  %v8656 = vsel %vm8479, %v6374, %v6613
  %v8659 = vsel %vm8479, %v6375, %v6615
  %v8662 = vsel %vm8479, %v6376, %v6617
  %v8665 = vsel %vm8479, %v6377, %v6619
  %v8668 = vsel %vm8479, %v6378, %v6621
  %v8671 = vsel %vm8479, %v6379, %v6623
  %vm8672 = vcmask 326656
  %v8674 = vsel %vm8672, %v8482, %v6633
  %v8676 = vsel %vm8672, %v8485, %v6635
  %v8678 = vsel %vm8672, %v8488, %v6637
  %v8680 = vsel %vm8672, %v8491, %v6639
  %v8682 = vsel %vm8672, %v8494, %v6641
  %v8684 = vsel %vm8672, %v8497, %v6643
  %v8686 = vsel %vm8672, %v8500, %v6645
  %v8688 = vsel %vm8672, %v8503, %v6647
  %v8690 = vsel %vm8672, %v8506, %v6649
  %v8692 = vsel %vm8672, %v8509, %v6651
  %v8694 = vsel %vm8672, %v8512, %v6653
  %v8696 = vsel %vm8672, %v8515, %v6655
  %v8698 = vsel %vm8672, %v8518, %v6657
  %v8700 = vsel %vm8672, %v8521, %v6659
  %v8702 = vsel %vm8672, %v8524, %v6661
  %v8704 = vsel %vm8672, %v8527, %v6663
  %v8706 = vsel %vm8672, %v8530, %v6665
  %v8708 = vsel %vm8672, %v8533, %v6667
  %v8710 = vsel %vm8672, %v8536, %v6669
  %v8712 = vsel %vm8672, %v8539, %v6671
  %v8714 = vsel %vm8672, %v8542, %v6673
  %v8716 = vsel %vm8672, %v8545, %v6675
  %v8718 = vsel %vm8672, %v8548, %v6677
  %v8720 = vsel %vm8672, %v8551, %v6679
  %v8722 = vsel %vm8672, %v8554, %v6681
  %v8724 = vsel %vm8672, %v8557, %v6683
  %v8726 = vsel %vm8672, %v8560, %v6685
  %v8728 = vsel %vm8672, %v8563, %v6687
  %v8730 = vsel %vm8672, %v8566, %v6689
  %v8732 = vsel %vm8672, %v8569, %v6691
  %v8734 = vsel %vm8672, %v8572, %v6693
  %v8736 = vsel %vm8672, %v8575, %v6695
  %v8738 = vsel %vm8672, %v8578, %v6697
  %v8740 = vsel %vm8672, %v8581, %v6699
  %v8742 = vsel %vm8672, %v8584, %v6701
  %v8744 = vsel %vm8672, %v8587, %v6703
  %v8746 = vsel %vm8672, %v8590, %v6705
  %v8748 = vsel %vm8672, %v8593, %v6707
  %v8750 = vsel %vm8672, %v8596, %v6709
  %v8752 = vsel %vm8672, %v8599, %v6711
  %v8754 = vsel %vm8672, %v8602, %v6713
  %v8756 = vsel %vm8672, %v8605, %v6715
  %v8758 = vsel %vm8672, %v8608, %v6717
  %v8760 = vsel %vm8672, %v8611, %v6719
  %v8762 = vsel %vm8672, %v8614, %v6721
  %v8764 = vsel %vm8672, %v8617, %v6723
  %v8766 = vsel %vm8672, %v8620, %v6725
  %v8768 = vsel %vm8672, %v8623, %v6727
  %v8770 = vsel %vm8672, %v8626, %v6729
  %v8772 = vsel %vm8672, %v8629, %v6731
  %v8774 = vsel %vm8672, %v8632, %v6733
  %v8776 = vsel %vm8672, %v8635, %v6735
  %v8778 = vsel %vm8672, %v8638, %v6737
  %v8780 = vsel %vm8672, %v8641, %v6739
  %v8782 = vsel %vm8672, %v8644, %v6741
  %v8784 = vsel %vm8672, %v8647, %v6743
  %v8786 = vsel %vm8672, %v8650, %v6745
  %v8788 = vsel %vm8672, %v8653, %v6747
  %v8790 = vsel %vm8672, %v8656, %v6749
  %v8792 = vsel %vm8672, %v8659, %v6751
  %v8794 = vsel %vm8672, %v8662, %v6753
  %v8796 = vsel %vm8672, %v8665, %v6755
  %v8798 = vsel %vm8672, %v8668, %v6757
  %v8800 = vsel %vm8672, %v8671, %v6759
  %vm8801 = vcmask 490496
  %v8803 = vsel %vm8801, %v8674, %v6769
  %v8805 = vsel %vm8801, %v8676, %v6771
  %v8807 = vsel %vm8801, %v8678, %v6773
  %v8809 = vsel %vm8801, %v8680, %v6775
  %v8811 = vsel %vm8801, %v8682, %v6777
  %v8813 = vsel %vm8801, %v8684, %v6779
  %v8815 = vsel %vm8801, %v8686, %v6781
  %v8817 = vsel %vm8801, %v8688, %v6783
  %v8819 = vsel %vm8801, %v8690, %v6785
  %v8821 = vsel %vm8801, %v8692, %v6787
  %v8823 = vsel %vm8801, %v8694, %v6789
  %v8825 = vsel %vm8801, %v8696, %v6791
  %v8827 = vsel %vm8801, %v8698, %v6793
  %v8829 = vsel %vm8801, %v8700, %v6795
  %v8831 = vsel %vm8801, %v8702, %v6797
  %v8833 = vsel %vm8801, %v8704, %v6799
  %v8835 = vsel %vm8801, %v8706, %v6801
  %v8837 = vsel %vm8801, %v8708, %v6803
  %v8839 = vsel %vm8801, %v8710, %v6805
  %v8841 = vsel %vm8801, %v8712, %v6807
  %v8843 = vsel %vm8801, %v8714, %v6809
  %v8845 = vsel %vm8801, %v8716, %v6811
  %v8847 = vsel %vm8801, %v8718, %v6813
  %v8849 = vsel %vm8801, %v8720, %v6815
  %v8851 = vsel %vm8801, %v8722, %v6817
  %v8853 = vsel %vm8801, %v8724, %v6819
  %v8855 = vsel %vm8801, %v8726, %v6821
  %v8857 = vsel %vm8801, %v8728, %v6823
  %v8859 = vsel %vm8801, %v8730, %v6825
  %v8861 = vsel %vm8801, %v8732, %v6827
  %v8863 = vsel %vm8801, %v8734, %v6829
  %v8865 = vsel %vm8801, %v8736, %v6831
  %v8867 = vsel %vm8801, %v8738, %v6833
  %v8869 = vsel %vm8801, %v8740, %v6835
  %v8871 = vsel %vm8801, %v8742, %v6837
  %v8873 = vsel %vm8801, %v8744, %v6839
  %v8875 = vsel %vm8801, %v8746, %v6841
  %v8877 = vsel %vm8801, %v8748, %v6843
  %v8879 = vsel %vm8801, %v8750, %v6845
  %v8881 = vsel %vm8801, %v8752, %v6847
  %v8883 = vsel %vm8801, %v8754, %v6849
  %v8885 = vsel %vm8801, %v8756, %v6851
  %v8887 = vsel %vm8801, %v8758, %v6853
  %v8889 = vsel %vm8801, %v8760, %v6855
  %v8891 = vsel %vm8801, %v8762, %v6857
  %v8893 = vsel %vm8801, %v8764, %v6859
  %v8895 = vsel %vm8801, %v8766, %v6861
  %v8897 = vsel %vm8801, %v8768, %v6863
  %v8899 = vsel %vm8801, %v8770, %v6865
  %v8901 = vsel %vm8801, %v8772, %v6867
  %v8903 = vsel %vm8801, %v8774, %v6869
  %v8905 = vsel %vm8801, %v8776, %v6871
  %v8907 = vsel %vm8801, %v8778, %v6873
  %v8909 = vsel %vm8801, %v8780, %v6875
  %v8911 = vsel %vm8801, %v8782, %v6877
  %v8913 = vsel %vm8801, %v8784, %v6879
  %v8915 = vsel %vm8801, %v8786, %v6881
  %v8917 = vsel %vm8801, %v8788, %v6883
  %v8919 = vsel %vm8801, %v8790, %v6885
  %v8921 = vsel %vm8801, %v8792, %v6887
  %v8923 = vsel %vm8801, %v8794, %v6889
  %v8925 = vsel %vm8801, %v8796, %v6891
  %v8927 = vsel %vm8801, %v8798, %v6893
  %v8929 = vsel %vm8801, %v8800, %v6895
  %vm8930 = vcmask 654336
  %v8932 = vsel %vm8930, %v8803, %v6905
  %v8934 = vsel %vm8930, %v8805, %v6907
  %v8936 = vsel %vm8930, %v8807, %v6909
  %v8938 = vsel %vm8930, %v8809, %v6911
  %v8940 = vsel %vm8930, %v8811, %v6913
  %v8942 = vsel %vm8930, %v8813, %v6915
  %v8944 = vsel %vm8930, %v8815, %v6917
  %v8946 = vsel %vm8930, %v8817, %v6919
  %v8948 = vsel %vm8930, %v8819, %v6921
  %v8950 = vsel %vm8930, %v8821, %v6923
  %v8952 = vsel %vm8930, %v8823, %v6925
  %v8954 = vsel %vm8930, %v8825, %v6927
  %v8956 = vsel %vm8930, %v8827, %v6929
  %v8958 = vsel %vm8930, %v8829, %v6931
  %v8960 = vsel %vm8930, %v8831, %v6933
  %v8962 = vsel %vm8930, %v8833, %v6935
  %v8964 = vsel %vm8930, %v8835, %v6937
  %v8966 = vsel %vm8930, %v8837, %v6939
  %v8968 = vsel %vm8930, %v8839, %v6941
  %v8970 = vsel %vm8930, %v8841, %v6943
  %v8972 = vsel %vm8930, %v8843, %v6945
  %v8974 = vsel %vm8930, %v8845, %v6947
  %v8976 = vsel %vm8930, %v8847, %v6949
  %v8978 = vsel %vm8930, %v8849, %v6951
  %v8980 = vsel %vm8930, %v8851, %v6953
  %v8982 = vsel %vm8930, %v8853, %v6955
  %v8984 = vsel %vm8930, %v8855, %v6957
  %v8986 = vsel %vm8930, %v8857, %v6959
  %v8988 = vsel %vm8930, %v8859, %v6961
  %v8990 = vsel %vm8930, %v8861, %v6963
  %v8992 = vsel %vm8930, %v8863, %v6965
  %v8994 = vsel %vm8930, %v8865, %v6967
  %v8996 = vsel %vm8930, %v8867, %v6969
  %v8998 = vsel %vm8930, %v8869, %v6971
  %v9000 = vsel %vm8930, %v8871, %v6973
  %v9002 = vsel %vm8930, %v8873, %v6975
  %v9004 = vsel %vm8930, %v8875, %v6977
  %v9006 = vsel %vm8930, %v8877, %v6979
  %v9008 = vsel %vm8930, %v8879, %v6981
  %v9010 = vsel %vm8930, %v8881, %v6983
  %v9012 = vsel %vm8930, %v8883, %v6985
  %v9014 = vsel %vm8930, %v8885, %v6987
  %v9016 = vsel %vm8930, %v8887, %v6989
  %v9018 = vsel %vm8930, %v8889, %v6991
  %v9020 = vsel %vm8930, %v8891, %v6993
  %v9022 = vsel %vm8930, %v8893, %v6995
  %v9024 = vsel %vm8930, %v8895, %v6997
  %v9026 = vsel %vm8930, %v8897, %v6999
  %v9028 = vsel %vm8930, %v8899, %v7001
  %v9030 = vsel %vm8930, %v8901, %v7003
  %v9032 = vsel %vm8930, %v8903, %v7005
  %v9034 = vsel %vm8930, %v8905, %v7007
  %v9036 = vsel %vm8930, %v8907, %v7009
  %v9038 = vsel %vm8930, %v8909, %v7011
  %v9040 = vsel %vm8930, %v8911, %v7013
  %v9042 = vsel %vm8930, %v8913, %v7015
  %v9044 = vsel %vm8930, %v8915, %v7017
  %v9046 = vsel %vm8930, %v8917, %v7019
  %v9048 = vsel %vm8930, %v8919, %v7021
  %v9050 = vsel %vm8930, %v8921, %v7023
  %v9052 = vsel %vm8930, %v8923, %v7025
  %v9054 = vsel %vm8930, %v8925, %v7027
  %v9056 = vsel %vm8930, %v8927, %v7029
  %v9058 = vsel %vm8930, %v8929, %v7031
  %vm9059 = vcmask 818176
  %v9061 = vsel %vm9059, %v8932, %v7048
  %v9063 = vsel %vm9059, %v8934, %v7050
  %v9065 = vsel %vm9059, %v8936, %v7052
  %v9067 = vsel %vm9059, %v8938, %v7054
  %v9069 = vsel %vm9059, %v8940, %v7056
  %v9071 = vsel %vm9059, %v8942, %v7058
  %v9073 = vsel %vm9059, %v8944, %v7060
  %v9075 = vsel %vm9059, %v8946, %v7062
  %v9077 = vsel %vm9059, %v8948, %v7064
  %v9079 = vsel %vm9059, %v8950, %v7066
  %v9081 = vsel %vm9059, %v8952, %v7068
  %v9083 = vsel %vm9059, %v8954, %v7070
  %v9085 = vsel %vm9059, %v8956, %v7072
  %v9087 = vsel %vm9059, %v8958, %v7074
  %v9089 = vsel %vm9059, %v8960, %v7076
  %v9091 = vsel %vm9059, %v8962, %v7078
  %v9093 = vsel %vm9059, %v8964, %v7080
  %v9095 = vsel %vm9059, %v8966, %v7082
  %v9097 = vsel %vm9059, %v8968, %v7084
  %v9099 = vsel %vm9059, %v8970, %v7086
  %v9101 = vsel %vm9059, %v8972, %v7088
  %v9103 = vsel %vm9059, %v8974, %v7090
  %v9105 = vsel %vm9059, %v8976, %v7092
  %v9107 = vsel %vm9059, %v8978, %v7094
  %v9109 = vsel %vm9059, %v8980, %v7096
  %v9111 = vsel %vm9059, %v8982, %v7098
  %v9113 = vsel %vm9059, %v8984, %v7100
  %v9115 = vsel %vm9059, %v8986, %v7102
  %v9117 = vsel %vm9059, %v8988, %v7104
  %v9119 = vsel %vm9059, %v8990, %v7106
  %v9121 = vsel %vm9059, %v8992, %v7108
  %v9123 = vsel %vm9059, %v8994, %v7110
  %v9125 = vsel %vm9059, %v8996, %v7112
  %v9127 = vsel %vm9059, %v8998, %v7114
  %v9129 = vsel %vm9059, %v9000, %v7116
  %v9131 = vsel %vm9059, %v9002, %v7118
  %v9133 = vsel %vm9059, %v9004, %v7120
  %v9135 = vsel %vm9059, %v9006, %v7122
  %v9137 = vsel %vm9059, %v9008, %v7124
  %v9139 = vsel %vm9059, %v9010, %v7126
  %v9141 = vsel %vm9059, %v9012, %v7128
  %v9143 = vsel %vm9059, %v9014, %v7130
  %v9145 = vsel %vm9059, %v9016, %v7132
  %v9147 = vsel %vm9059, %v9018, %v7134
  %v9149 = vsel %vm9059, %v9020, %v7136
  %v9151 = vsel %vm9059, %v9022, %v7138
  %v9153 = vsel %vm9059, %v9024, %v7140
  %v9155 = vsel %vm9059, %v9026, %v7142
  %v9157 = vsel %vm9059, %v9028, %v7144
  %v9159 = vsel %vm9059, %v9030, %v7146
  %v9161 = vsel %vm9059, %v9032, %v7148
  %v9163 = vsel %vm9059, %v9034, %v7150
  %v9165 = vsel %vm9059, %v9036, %v7152
  %v9167 = vsel %vm9059, %v9038, %v7154
  %v9169 = vsel %vm9059, %v9040, %v7156
  %v9171 = vsel %vm9059, %v9042, %v7158
  %v9173 = vsel %vm9059, %v9044, %v7160
  %v9175 = vsel %vm9059, %v9046, %v7162
  %v9177 = vsel %vm9059, %v9048, %v7164
  %v9179 = vsel %vm9059, %v9050, %v7166
  %v9181 = vsel %vm9059, %v9052, %v7168
  %v9183 = vsel %vm9059, %v9054, %v7170
  %v9185 = vsel %vm9059, %v9056, %v7172
  %v9187 = vsel %vm9059, %v9058, %v7174
  %vm9188 = vcmask 982016
  %v9190 = vsel %vm9188, %v9061, %v7177
  %v9192 = vsel %vm9188, %v9063, %v7179
  %v9194 = vsel %vm9188, %v9065, %v7181
  %v9196 = vsel %vm9188, %v9067, %v7183
  %v9198 = vsel %vm9188, %v9069, %v7185
  %v9200 = vsel %vm9188, %v9071, %v7187
  %v9202 = vsel %vm9188, %v9073, %v7189
  %v9204 = vsel %vm9188, %v9075, %v7191
  %v9206 = vsel %vm9188, %v9077, %v7193
  %v9208 = vsel %vm9188, %v9079, %v7195
  %v9210 = vsel %vm9188, %v9081, %v7197
  %v9212 = vsel %vm9188, %v9083, %v7199
  %v9214 = vsel %vm9188, %v9085, %v7201
  %v9216 = vsel %vm9188, %v9087, %v7203
  %v9218 = vsel %vm9188, %v9089, %v7205
  %v9220 = vsel %vm9188, %v9091, %v7207
  %v9222 = vsel %vm9188, %v9093, %v7209
  %v9224 = vsel %vm9188, %v9095, %v7211
  %v9226 = vsel %vm9188, %v9097, %v7213
  %v9228 = vsel %vm9188, %v9099, %v7215
  %v9230 = vsel %vm9188, %v9101, %v7217
  %v9232 = vsel %vm9188, %v9103, %v7219
  %v9234 = vsel %vm9188, %v9105, %v7221
  %v9236 = vsel %vm9188, %v9107, %v7223
  %v9238 = vsel %vm9188, %v9109, %v7225
  %v9240 = vsel %vm9188, %v9111, %v7227
  %v9242 = vsel %vm9188, %v9113, %v7229
  %v9244 = vsel %vm9188, %v9115, %v7231
  %v9246 = vsel %vm9188, %v9117, %v7233
  %v9248 = vsel %vm9188, %v9119, %v7235
  %v9250 = vsel %vm9188, %v9121, %v7237
  %v9252 = vsel %vm9188, %v9123, %v7239
  %v9254 = vsel %vm9188, %v9125, %v7241
  %v9256 = vsel %vm9188, %v9127, %v7243
  %v9258 = vsel %vm9188, %v9129, %v7245
  %v9260 = vsel %vm9188, %v9131, %v7247
  %v9262 = vsel %vm9188, %v9133, %v7249
  %v9264 = vsel %vm9188, %v9135, %v7251
  %v9266 = vsel %vm9188, %v9137, %v7253
  %v9268 = vsel %vm9188, %v9139, %v7255
  %v9270 = vsel %vm9188, %v9141, %v7257
  %v9272 = vsel %vm9188, %v9143, %v7259
  %v9274 = vsel %vm9188, %v9145, %v7261
  %v9276 = vsel %vm9188, %v9147, %v7263
  %v9278 = vsel %vm9188, %v9149, %v7265
  %v9280 = vsel %vm9188, %v9151, %v7267
  %v9282 = vsel %vm9188, %v9153, %v7269
  %v9284 = vsel %vm9188, %v9155, %v7271
  %v9286 = vsel %vm9188, %v9157, %v7273
  %v9288 = vsel %vm9188, %v9159, %v7275
  %v9290 = vsel %vm9188, %v9161, %v7277
  %v9292 = vsel %vm9188, %v9163, %v7279
  %v9294 = vsel %vm9188, %v9165, %v7281
  %v9296 = vsel %vm9188, %v9167, %v7283
  %v9298 = vsel %vm9188, %v9169, %v7285
  %v9300 = vsel %vm9188, %v9171, %v7287
  %v9302 = vsel %vm9188, %v9173, %v7289
  %v9304 = vsel %vm9188, %v9175, %v7291
  %v9306 = vsel %vm9188, %v9177, %v7293
  %v9308 = vsel %vm9188, %v9179, %v7295
  %v9310 = vsel %vm9188, %v9181, %v7297
  %v9312 = vsel %vm9188, %v9183, %v7299
  %v9314 = vsel %vm9188, %v9185, %v7301
  %v9316 = vsel %vm9188, %v9187, %v7303
  %vm9317 = vcmask 97280
  %v9319 = vsel %vm9317, %v7177, %v7306
  %v9321 = vsel %vm9317, %v7179, %v7308
  %v9323 = vsel %vm9317, %v7181, %v7310
  %v9325 = vsel %vm9317, %v7183, %v7312
  %v9327 = vsel %vm9317, %v7185, %v7314
  %v9329 = vsel %vm9317, %v7187, %v7316
  %v9331 = vsel %vm9317, %v7189, %v7318
  %v9333 = vsel %vm9317, %v7191, %v7320
  %v9335 = vsel %vm9317, %v7193, %v7322
  %v9337 = vsel %vm9317, %v7195, %v7324
  %v9339 = vsel %vm9317, %v7197, %v7326
  %v9341 = vsel %vm9317, %v7199, %v7328
  %v9343 = vsel %vm9317, %v7201, %v7330
  %v9345 = vsel %vm9317, %v7203, %v7332
  %v9347 = vsel %vm9317, %v7205, %v7334
  %v9349 = vsel %vm9317, %v7207, %v7336
  %v9351 = vsel %vm9317, %v7209, %v7338
  %v9353 = vsel %vm9317, %v7211, %v7340
  %v9355 = vsel %vm9317, %v7213, %v7342
  %v9357 = vsel %vm9317, %v7215, %v7344
  %v9359 = vsel %vm9317, %v7217, %v7346
  %v9361 = vsel %vm9317, %v7219, %v7348
  %v9363 = vsel %vm9317, %v7221, %v7350
  %v9365 = vsel %vm9317, %v7223, %v7352
  %v9367 = vsel %vm9317, %v7225, %v7354
  %v9369 = vsel %vm9317, %v7227, %v7356
  %v9371 = vsel %vm9317, %v7229, %v7358
  %v9373 = vsel %vm9317, %v7231, %v7360
  %v9375 = vsel %vm9317, %v7233, %v7362
  %v9377 = vsel %vm9317, %v7235, %v7364
  %v9379 = vsel %vm9317, %v7237, %v7366
  %v9381 = vsel %vm9317, %v7239, %v7368
  %v9383 = vsel %vm9317, %v7241, %v7370
  %v9385 = vsel %vm9317, %v7243, %v7372
  %v9387 = vsel %vm9317, %v7245, %v7374
  %v9389 = vsel %vm9317, %v7247, %v7376
  %v9391 = vsel %vm9317, %v7249, %v7378
  %v9393 = vsel %vm9317, %v7251, %v7380
  %v9395 = vsel %vm9317, %v7253, %v7382
  %v9397 = vsel %vm9317, %v7255, %v7384
  %v9399 = vsel %vm9317, %v7257, %v7386
  %v9401 = vsel %vm9317, %v7259, %v7388
  %v9403 = vsel %vm9317, %v7261, %v7390
  %v9405 = vsel %vm9317, %v7263, %v7392
  %v9407 = vsel %vm9317, %v7265, %v7394
  %v9409 = vsel %vm9317, %v7267, %v7396
  %v9411 = vsel %vm9317, %v7269, %v7398
  %v9413 = vsel %vm9317, %v7271, %v7400
  %v9415 = vsel %vm9317, %v7273, %v7402
  %v9417 = vsel %vm9317, %v7275, %v7404
  %v9419 = vsel %vm9317, %v7277, %v7406
  %v9421 = vsel %vm9317, %v7279, %v7408
  %v9423 = vsel %vm9317, %v7281, %v7410
  %v9425 = vsel %vm9317, %v7283, %v7412
  %v9427 = vsel %vm9317, %v7285, %v7414
  %v9429 = vsel %vm9317, %v7287, %v7416
  %v9431 = vsel %vm9317, %v7289, %v7418
  %v9433 = vsel %vm9317, %v7291, %v7420
  %v9435 = vsel %vm9317, %v7293, %v7422
  %v9437 = vsel %vm9317, %v7295, %v7424
  %v9439 = vsel %vm9317, %v7297, %v7426
  %v9441 = vsel %vm9317, %v7299, %v7428
  %v9443 = vsel %vm9317, %v7301, %v7430
  %v9445 = vsel %vm9317, %v7303, %v7432
  %vm9446 = vcmask 261120
  %v9448 = vsel %vm9446, %v9319, %v7435
  %v9450 = vsel %vm9446, %v9321, %v7437
  %v9452 = vsel %vm9446, %v9323, %v7439
  %v9454 = vsel %vm9446, %v9325, %v7441
  %v9456 = vsel %vm9446, %v9327, %v7443
  %v9458 = vsel %vm9446, %v9329, %v7445
  %v9460 = vsel %vm9446, %v9331, %v7447
  %v9462 = vsel %vm9446, %v9333, %v7449
  %v9464 = vsel %vm9446, %v9335, %v7451
  %v9466 = vsel %vm9446, %v9337, %v7453
  %v9468 = vsel %vm9446, %v9339, %v7455
  %v9470 = vsel %vm9446, %v9341, %v7457
  %v9472 = vsel %vm9446, %v9343, %v7459
  %v9474 = vsel %vm9446, %v9345, %v7461
  %v9476 = vsel %vm9446, %v9347, %v7463
  %v9478 = vsel %vm9446, %v9349, %v7465
  %v9480 = vsel %vm9446, %v9351, %v7467
  %v9482 = vsel %vm9446, %v9353, %v7469
  %v9484 = vsel %vm9446, %v9355, %v7471
  %v9486 = vsel %vm9446, %v9357, %v7473
  %v9488 = vsel %vm9446, %v9359, %v7475
  %v9490 = vsel %vm9446, %v9361, %v7477
  %v9492 = vsel %vm9446, %v9363, %v7479
  %v9494 = vsel %vm9446, %v9365, %v7481
  %v9496 = vsel %vm9446, %v9367, %v7483
  %v9498 = vsel %vm9446, %v9369, %v7485
  %v9500 = vsel %vm9446, %v9371, %v7487
  %v9502 = vsel %vm9446, %v9373, %v7489
  %v9504 = vsel %vm9446, %v9375, %v7491
  %v9506 = vsel %vm9446, %v9377, %v7493
  %v9508 = vsel %vm9446, %v9379, %v7495
  %v9510 = vsel %vm9446, %v9381, %v7497
  %v9512 = vsel %vm9446, %v9383, %v7499
  %v9514 = vsel %vm9446, %v9385, %v7501
  %v9516 = vsel %vm9446, %v9387, %v7503
  %v9518 = vsel %vm9446, %v9389, %v7505
  %v9520 = vsel %vm9446, %v9391, %v7507
  %v9522 = vsel %vm9446, %v9393, %v7509
  %v9524 = vsel %vm9446, %v9395, %v7511
  %v9526 = vsel %vm9446, %v9397, %v7513
  %v9528 = vsel %vm9446, %v9399, %v7515
  %v9530 = vsel %vm9446, %v9401, %v7517
  %v9532 = vsel %vm9446, %v9403, %v7519
  %v9534 = vsel %vm9446, %v9405, %v7521
  %v9536 = vsel %vm9446, %v9407, %v7523
  %v9538 = vsel %vm9446, %v9409, %v7525
  %v9540 = vsel %vm9446, %v9411, %v7527
  %v9542 = vsel %vm9446, %v9413, %v7529
  %v9544 = vsel %vm9446, %v9415, %v7531
  %v9546 = vsel %vm9446, %v9417, %v7533
  %v9548 = vsel %vm9446, %v9419, %v7535
  %v9550 = vsel %vm9446, %v9421, %v7537
  %v9552 = vsel %vm9446, %v9423, %v7539
  %v9554 = vsel %vm9446, %v9425, %v7541
  %v9556 = vsel %vm9446, %v9427, %v7543
  %v9558 = vsel %vm9446, %v9429, %v7545
  %v9560 = vsel %vm9446, %v9431, %v7547
  %v9562 = vsel %vm9446, %v9433, %v7549
  %v9564 = vsel %vm9446, %v9435, %v7551
  %v9566 = vsel %vm9446, %v9437, %v7553
  %v9568 = vsel %vm9446, %v9439, %v7555
  %v9570 = vsel %vm9446, %v9441, %v7557
  %v9572 = vsel %vm9446, %v9443, %v7559
  %v9574 = vsel %vm9446, %v9445, %v7561
  %vm9575 = vcmask 424960
  %v9577 = vsel %vm9575, %v9448, %v7564
  %v9579 = vsel %vm9575, %v9450, %v7566
  %v9581 = vsel %vm9575, %v9452, %v7568
  %v9583 = vsel %vm9575, %v9454, %v7570
  %v9585 = vsel %vm9575, %v9456, %v7572
  %v9587 = vsel %vm9575, %v9458, %v7574
  %v9589 = vsel %vm9575, %v9460, %v7576
  %v9591 = vsel %vm9575, %v9462, %v7578
  %v9593 = vsel %vm9575, %v9464, %v7580
  %v9595 = vsel %vm9575, %v9466, %v7582
  %v9597 = vsel %vm9575, %v9468, %v7584
  %v9599 = vsel %vm9575, %v9470, %v7586
  %v9601 = vsel %vm9575, %v9472, %v7588
  %v9603 = vsel %vm9575, %v9474, %v7590
  %v9605 = vsel %vm9575, %v9476, %v7592
  %v9607 = vsel %vm9575, %v9478, %v7594
  %v9609 = vsel %vm9575, %v9480, %v7596
  %v9611 = vsel %vm9575, %v9482, %v7598
  %v9613 = vsel %vm9575, %v9484, %v7600
  %v9615 = vsel %vm9575, %v9486, %v7602
  %v9617 = vsel %vm9575, %v9488, %v7604
  %v9619 = vsel %vm9575, %v9490, %v7606
  %v9621 = vsel %vm9575, %v9492, %v7608
  %v9623 = vsel %vm9575, %v9494, %v7610
  %v9625 = vsel %vm9575, %v9496, %v7612
  %v9627 = vsel %vm9575, %v9498, %v7614
  %v9629 = vsel %vm9575, %v9500, %v7616
  %v9631 = vsel %vm9575, %v9502, %v7618
  %v9633 = vsel %vm9575, %v9504, %v7620
  %v9635 = vsel %vm9575, %v9506, %v7622
  %v9637 = vsel %vm9575, %v9508, %v7624
  %v9639 = vsel %vm9575, %v9510, %v7626
  %v9641 = vsel %vm9575, %v9512, %v7628
  %v9643 = vsel %vm9575, %v9514, %v7630
  %v9645 = vsel %vm9575, %v9516, %v7632
  %v9647 = vsel %vm9575, %v9518, %v7634
  %v9649 = vsel %vm9575, %v9520, %v7636
  %v9651 = vsel %vm9575, %v9522, %v7638
  %v9653 = vsel %vm9575, %v9524, %v7640
  %v9655 = vsel %vm9575, %v9526, %v7642
  %v9657 = vsel %vm9575, %v9528, %v7644
  %v9659 = vsel %vm9575, %v9530, %v7646
  %v9661 = vsel %vm9575, %v9532, %v7648
  %v9663 = vsel %vm9575, %v9534, %v7650
  %v9665 = vsel %vm9575, %v9536, %v7652
  %v9667 = vsel %vm9575, %v9538, %v7654
  %v9669 = vsel %vm9575, %v9540, %v7656
  %v9671 = vsel %vm9575, %v9542, %v7658
  %v9673 = vsel %vm9575, %v9544, %v7660
  %v9675 = vsel %vm9575, %v9546, %v7662
  %v9677 = vsel %vm9575, %v9548, %v7664
  %v9679 = vsel %vm9575, %v9550, %v7666
  %v9681 = vsel %vm9575, %v9552, %v7668
  %v9683 = vsel %vm9575, %v9554, %v7670
  %v9685 = vsel %vm9575, %v9556, %v7672
  %v9687 = vsel %vm9575, %v9558, %v7674
  %v9689 = vsel %vm9575, %v9560, %v7676
  %v9691 = vsel %vm9575, %v9562, %v7678
  %v9693 = vsel %vm9575, %v9564, %v7680
  %v9695 = vsel %vm9575, %v9566, %v7682
  %v9697 = vsel %vm9575, %v9568, %v7684
  %v9699 = vsel %vm9575, %v9570, %v7686
  %v9701 = vsel %vm9575, %v9572, %v7688
  %v9703 = vsel %vm9575, %v9574, %v7690
  %vm9704 = vcmask 588800
  %v9706 = vsel %vm9704, %v9577, %v7700
  %v9708 = vsel %vm9704, %v9579, %v7702
  %v9710 = vsel %vm9704, %v9581, %v7704
  %v9712 = vsel %vm9704, %v9583, %v7706
  %v9714 = vsel %vm9704, %v9585, %v7708
  %v9716 = vsel %vm9704, %v9587, %v7710
  %v9718 = vsel %vm9704, %v9589, %v7712
  %v9720 = vsel %vm9704, %v9591, %v7714
  %v9722 = vsel %vm9704, %v9593, %v7716
  %v9724 = vsel %vm9704, %v9595, %v7718
  %v9726 = vsel %vm9704, %v9597, %v7720
  %v9728 = vsel %vm9704, %v9599, %v7722
  %v9730 = vsel %vm9704, %v9601, %v7724
  %v9732 = vsel %vm9704, %v9603, %v7726
  %v9734 = vsel %vm9704, %v9605, %v7728
  %v9736 = vsel %vm9704, %v9607, %v7730
  %v9738 = vsel %vm9704, %v9609, %v7732
  %v9740 = vsel %vm9704, %v9611, %v7734
  %v9742 = vsel %vm9704, %v9613, %v7736
  %v9744 = vsel %vm9704, %v9615, %v7738
  %v9746 = vsel %vm9704, %v9617, %v7740
  %v9748 = vsel %vm9704, %v9619, %v7742
  %v9750 = vsel %vm9704, %v9621, %v7744
  %v9752 = vsel %vm9704, %v9623, %v7746
  %v9754 = vsel %vm9704, %v9625, %v7748
  %v9756 = vsel %vm9704, %v9627, %v7750
  %v9758 = vsel %vm9704, %v9629, %v7752
  %v9760 = vsel %vm9704, %v9631, %v7754
  %v9762 = vsel %vm9704, %v9633, %v7756
  %v9764 = vsel %vm9704, %v9635, %v7758
  %v9766 = vsel %vm9704, %v9637, %v7760
  %v9768 = vsel %vm9704, %v9639, %v7762
  %v9770 = vsel %vm9704, %v9641, %v7764
  %v9772 = vsel %vm9704, %v9643, %v7766
  %v9774 = vsel %vm9704, %v9645, %v7768
  %v9776 = vsel %vm9704, %v9647, %v7770
  %v9778 = vsel %vm9704, %v9649, %v7772
  %v9780 = vsel %vm9704, %v9651, %v7774
  %v9782 = vsel %vm9704, %v9653, %v7776
  %v9784 = vsel %vm9704, %v9655, %v7778
  %v9786 = vsel %vm9704, %v9657, %v7780
  %v9788 = vsel %vm9704, %v9659, %v7782
  %v9790 = vsel %vm9704, %v9661, %v7784
  %v9792 = vsel %vm9704, %v9663, %v7786
  %v9794 = vsel %vm9704, %v9665, %v7788
  %v9796 = vsel %vm9704, %v9667, %v7790
  %v9798 = vsel %vm9704, %v9669, %v7792
  %v9800 = vsel %vm9704, %v9671, %v7794
  %v9802 = vsel %vm9704, %v9673, %v7796
  %v9804 = vsel %vm9704, %v9675, %v7798
  %v9806 = vsel %vm9704, %v9677, %v7800
  %v9808 = vsel %vm9704, %v9679, %v7802
  %v9810 = vsel %vm9704, %v9681, %v7804
  %v9812 = vsel %vm9704, %v9683, %v7806
  %v9814 = vsel %vm9704, %v9685, %v7808
  %v9816 = vsel %vm9704, %v9687, %v7810
  %v9818 = vsel %vm9704, %v9689, %v7812
  %v9820 = vsel %vm9704, %v9691, %v7814
  %v9822 = vsel %vm9704, %v9693, %v7816
  %v9824 = vsel %vm9704, %v9695, %v7818
  %v9826 = vsel %vm9704, %v9697, %v7820
  %v9828 = vsel %vm9704, %v9699, %v7822
  %v9830 = vsel %vm9704, %v9701, %v7824
  %v9832 = vsel %vm9704, %v9703, %v7826
  %vm9833 = vcmask 752640
  %v9835 = vsel %vm9833, %v9706, %v7829
  %v9837 = vsel %vm9833, %v9708, %v7831
  %v9839 = vsel %vm9833, %v9710, %v7833
  %v9841 = vsel %vm9833, %v9712, %v7835
  %v9843 = vsel %vm9833, %v9714, %v7837
  %v9845 = vsel %vm9833, %v9716, %v7839
  %v9847 = vsel %vm9833, %v9718, %v7841
  %v9849 = vsel %vm9833, %v9720, %v7843
  %v9851 = vsel %vm9833, %v9722, %v7845
  %v9853 = vsel %vm9833, %v9724, %v7847
  %v9855 = vsel %vm9833, %v9726, %v7849
  %v9857 = vsel %vm9833, %v9728, %v7851
  %v9859 = vsel %vm9833, %v9730, %v7853
  %v9861 = vsel %vm9833, %v9732, %v7855
  %v9863 = vsel %vm9833, %v9734, %v7857
  %v9865 = vsel %vm9833, %v9736, %v7859
  %v9867 = vsel %vm9833, %v9738, %v7861
  %v9869 = vsel %vm9833, %v9740, %v7863
  %v9871 = vsel %vm9833, %v9742, %v7865
  %v9873 = vsel %vm9833, %v9744, %v7867
  %v9875 = vsel %vm9833, %v9746, %v7869
  %v9877 = vsel %vm9833, %v9748, %v7871
  %v9879 = vsel %vm9833, %v9750, %v7873
  %v9881 = vsel %vm9833, %v9752, %v7875
  %v9883 = vsel %vm9833, %v9754, %v7877
  %v9885 = vsel %vm9833, %v9756, %v7879
  %v9887 = vsel %vm9833, %v9758, %v7881
  %v9889 = vsel %vm9833, %v9760, %v7883
  %v9891 = vsel %vm9833, %v9762, %v7885
  %v9893 = vsel %vm9833, %v9764, %v7887
  %v9895 = vsel %vm9833, %v9766, %v7889
  %v9897 = vsel %vm9833, %v9768, %v7891
  %v9899 = vsel %vm9833, %v9770, %v7893
  %v9901 = vsel %vm9833, %v9772, %v7895
  %v9903 = vsel %vm9833, %v9774, %v7897
  %v9905 = vsel %vm9833, %v9776, %v7899
  %v9907 = vsel %vm9833, %v9778, %v7901
  %v9909 = vsel %vm9833, %v9780, %v7903
  %v9911 = vsel %vm9833, %v9782, %v7905
  %v9913 = vsel %vm9833, %v9784, %v7907
  %v9915 = vsel %vm9833, %v9786, %v7909
  %v9917 = vsel %vm9833, %v9788, %v7911
  %v9919 = vsel %vm9833, %v9790, %v7913
  %v9921 = vsel %vm9833, %v9792, %v7915
  %v9923 = vsel %vm9833, %v9794, %v7917
  %v9925 = vsel %vm9833, %v9796, %v7919
  %v9927 = vsel %vm9833, %v9798, %v7921
  %v9929 = vsel %vm9833, %v9800, %v7923
  %v9931 = vsel %vm9833, %v9802, %v7925
  %v9933 = vsel %vm9833, %v9804, %v7927
  %v9935 = vsel %vm9833, %v9806, %v7929
  %v9937 = vsel %vm9833, %v9808, %v7931
  %v9939 = vsel %vm9833, %v9810, %v7933
  %v9941 = vsel %vm9833, %v9812, %v7935
  %v9943 = vsel %vm9833, %v9814, %v7937
  %v9945 = vsel %vm9833, %v9816, %v7939
  %v9947 = vsel %vm9833, %v9818, %v7941
  %v9949 = vsel %vm9833, %v9820, %v7943
  %v9951 = vsel %vm9833, %v9822, %v7945
  %v9953 = vsel %vm9833, %v9824, %v7947
  %v9955 = vsel %vm9833, %v9826, %v7949
  %v9957 = vsel %vm9833, %v9828, %v7951
  %v9959 = vsel %vm9833, %v9830, %v7953
  %v9961 = vsel %vm9833, %v9832, %v7955
  %vm9962 = vcmask 916480
  %v9964 = vsel %vm9962, %v9835, %v7958
  %v9966 = vsel %vm9962, %v9837, %v7960
  %v9968 = vsel %vm9962, %v9839, %v7962
  %v9970 = vsel %vm9962, %v9841, %v7964
  %v9972 = vsel %vm9962, %v9843, %v7966
  %v9974 = vsel %vm9962, %v9845, %v7968
  %v9976 = vsel %vm9962, %v9847, %v7970
  %v9978 = vsel %vm9962, %v9849, %v7972
  %v9980 = vsel %vm9962, %v9851, %v7974
  %v9982 = vsel %vm9962, %v9853, %v7976
  %v9984 = vsel %vm9962, %v9855, %v7978
  %v9986 = vsel %vm9962, %v9857, %v7980
  %v9988 = vsel %vm9962, %v9859, %v7982
  %v9990 = vsel %vm9962, %v9861, %v7984
  %v9992 = vsel %vm9962, %v9863, %v7986
  %v9994 = vsel %vm9962, %v9865, %v7988
  %v9996 = vsel %vm9962, %v9867, %v7990
  %v9998 = vsel %vm9962, %v9869, %v7992
  %v10000 = vsel %vm9962, %v9871, %v7994
  %v10002 = vsel %vm9962, %v9873, %v7996
  %v10004 = vsel %vm9962, %v9875, %v7998
  %v10006 = vsel %vm9962, %v9877, %v8000
  %v10008 = vsel %vm9962, %v9879, %v8002
  %v10010 = vsel %vm9962, %v9881, %v8004
  %v10012 = vsel %vm9962, %v9883, %v8006
  %v10014 = vsel %vm9962, %v9885, %v8008
  %v10016 = vsel %vm9962, %v9887, %v8010
  %v10018 = vsel %vm9962, %v9889, %v8012
  %v10020 = vsel %vm9962, %v9891, %v8014
  %v10022 = vsel %vm9962, %v9893, %v8016
  %v10024 = vsel %vm9962, %v9895, %v8018
  %v10026 = vsel %vm9962, %v9897, %v8020
  %v10028 = vsel %vm9962, %v9899, %v8022
  %v10030 = vsel %vm9962, %v9901, %v8024
  %v10032 = vsel %vm9962, %v9903, %v8026
  %v10034 = vsel %vm9962, %v9905, %v8028
  %v10036 = vsel %vm9962, %v9907, %v8030
  %v10038 = vsel %vm9962, %v9909, %v8032
  %v10040 = vsel %vm9962, %v9911, %v8034
  %v10042 = vsel %vm9962, %v9913, %v8036
  %v10044 = vsel %vm9962, %v9915, %v8038
  %v10046 = vsel %vm9962, %v9917, %v8040
  %v10048 = vsel %vm9962, %v9919, %v8042
  %v10050 = vsel %vm9962, %v9921, %v8044
  %v10052 = vsel %vm9962, %v9923, %v8046
  %v10054 = vsel %vm9962, %v9925, %v8048
  %v10056 = vsel %vm9962, %v9927, %v8050
  %v10058 = vsel %vm9962, %v9929, %v8052
  %v10060 = vsel %vm9962, %v9931, %v8054
  %v10062 = vsel %vm9962, %v9933, %v8056
  %v10064 = vsel %vm9962, %v9935, %v8058
  %v10066 = vsel %vm9962, %v9937, %v8060
  %v10068 = vsel %vm9962, %v9939, %v8062
  %v10070 = vsel %vm9962, %v9941, %v8064
  %v10072 = vsel %vm9962, %v9943, %v8066
  %v10074 = vsel %vm9962, %v9945, %v8068
  %v10076 = vsel %vm9962, %v9947, %v8070
  %v10078 = vsel %vm9962, %v9949, %v8072
  %v10080 = vsel %vm9962, %v9951, %v8074
  %v10082 = vsel %vm9962, %v9953, %v8076
  %v10084 = vsel %vm9962, %v9955, %v8078
  %v10086 = vsel %vm9962, %v9957, %v8080
  %v10088 = vsel %vm9962, %v9959, %v8082
  %v10090 = vsel %vm9962, %v9961, %v8084
  %vm10091 = vcmask 31744
  %v10093 = vsel %vm10091, %v7958, %v8087
  %v10095 = vsel %vm10091, %v7960, %v8089
  %v10097 = vsel %vm10091, %v7962, %v8091
  %v10099 = vsel %vm10091, %v7964, %v8093
  %v10101 = vsel %vm10091, %v7966, %v8095
  %v10103 = vsel %vm10091, %v7968, %v8097
  %v10105 = vsel %vm10091, %v7970, %v8099
  %v10107 = vsel %vm10091, %v7972, %v8101
  %v10109 = vsel %vm10091, %v7974, %v8103
  %v10111 = vsel %vm10091, %v7976, %v8105
  %v10113 = vsel %vm10091, %v7978, %v8107
  %v10115 = vsel %vm10091, %v7980, %v8109
  %v10117 = vsel %vm10091, %v7982, %v8111
  %v10119 = vsel %vm10091, %v7984, %v8113
  %v10121 = vsel %vm10091, %v7986, %v8115
  %v10123 = vsel %vm10091, %v7988, %v8117
  %v10125 = vsel %vm10091, %v7990, %v8119
  %v10127 = vsel %vm10091, %v7992, %v8121
  %v10129 = vsel %vm10091, %v7994, %v8123
  %v10131 = vsel %vm10091, %v7996, %v8125
  %v10133 = vsel %vm10091, %v7998, %v8127
  %v10135 = vsel %vm10091, %v8000, %v8129
  %v10137 = vsel %vm10091, %v8002, %v8131
  %v10139 = vsel %vm10091, %v8004, %v8133
  %v10141 = vsel %vm10091, %v8006, %v8135
  %v10143 = vsel %vm10091, %v8008, %v8137
  %v10145 = vsel %vm10091, %v8010, %v8139
  %v10147 = vsel %vm10091, %v8012, %v8141
  %v10149 = vsel %vm10091, %v8014, %v8143
  %v10151 = vsel %vm10091, %v8016, %v8145
  %v10153 = vsel %vm10091, %v8018, %v8147
  %v10155 = vsel %vm10091, %v8020, %v8149
  %v10157 = vsel %vm10091, %v8022, %v8151
  %v10159 = vsel %vm10091, %v8024, %v8153
  %v10161 = vsel %vm10091, %v8026, %v8155
  %v10163 = vsel %vm10091, %v8028, %v8157
  %v10165 = vsel %vm10091, %v8030, %v8159
  %v10167 = vsel %vm10091, %v8032, %v8161
  %v10169 = vsel %vm10091, %v8034, %v8163
  %v10171 = vsel %vm10091, %v8036, %v8165
  %v10173 = vsel %vm10091, %v8038, %v8167
  %v10175 = vsel %vm10091, %v8040, %v8169
  %v10177 = vsel %vm10091, %v8042, %v8171
  %v10179 = vsel %vm10091, %v8044, %v8173
  %v10181 = vsel %vm10091, %v8046, %v8175
  %v10183 = vsel %vm10091, %v8048, %v8177
  %v10185 = vsel %vm10091, %v8050, %v8179
  %v10187 = vsel %vm10091, %v8052, %v8181
  %v10189 = vsel %vm10091, %v8054, %v8183
  %v10191 = vsel %vm10091, %v8056, %v8185
  %v10193 = vsel %vm10091, %v8058, %v8187
  %v10195 = vsel %vm10091, %v8060, %v8189
  %v10197 = vsel %vm10091, %v8062, %v8191
  %v10199 = vsel %vm10091, %v8064, %v8193
  %v10201 = vsel %vm10091, %v8066, %v8195
  %v10203 = vsel %vm10091, %v8068, %v8197
  %v10205 = vsel %vm10091, %v8070, %v8199
  %v10207 = vsel %vm10091, %v8072, %v8201
  %v10209 = vsel %vm10091, %v8074, %v8203
  %v10211 = vsel %vm10091, %v8076, %v8205
  %v10213 = vsel %vm10091, %v8078, %v8207
  %v10215 = vsel %vm10091, %v8080, %v8209
  %v10217 = vsel %vm10091, %v8082, %v8211
  %v10219 = vsel %vm10091, %v8084, %v8213
  %vm10220 = vcmask 195584
  %v10222 = vsel %vm10220, %v10093, %v8216
  %v10224 = vsel %vm10220, %v10095, %v8218
  %v10226 = vsel %vm10220, %v10097, %v8220
  %v10228 = vsel %vm10220, %v10099, %v8222
  %v10230 = vsel %vm10220, %v10101, %v8224
  %v10232 = vsel %vm10220, %v10103, %v8226
  %v10234 = vsel %vm10220, %v10105, %v8228
  %v10236 = vsel %vm10220, %v10107, %v8230
  %v10238 = vsel %vm10220, %v10109, %v8232
  %v10240 = vsel %vm10220, %v10111, %v8234
  %v10242 = vsel %vm10220, %v10113, %v8236
  %v10244 = vsel %vm10220, %v10115, %v8238
  %v10246 = vsel %vm10220, %v10117, %v8240
  %v10248 = vsel %vm10220, %v10119, %v8242
  %v10250 = vsel %vm10220, %v10121, %v8244
  %v10252 = vsel %vm10220, %v10123, %v8246
  %v10254 = vsel %vm10220, %v10125, %v8248
  %v10256 = vsel %vm10220, %v10127, %v8250
  %v10258 = vsel %vm10220, %v10129, %v8252
  %v10260 = vsel %vm10220, %v10131, %v8254
  %v10262 = vsel %vm10220, %v10133, %v8256
  %v10264 = vsel %vm10220, %v10135, %v8258
  %v10266 = vsel %vm10220, %v10137, %v8260
  %v10268 = vsel %vm10220, %v10139, %v8262
  %v10270 = vsel %vm10220, %v10141, %v8264
  %v10272 = vsel %vm10220, %v10143, %v8266
  %v10274 = vsel %vm10220, %v10145, %v8268
  %v10276 = vsel %vm10220, %v10147, %v8270
  %v10278 = vsel %vm10220, %v10149, %v8272
  %v10280 = vsel %vm10220, %v10151, %v8274
  %v10282 = vsel %vm10220, %v10153, %v8276
  %v10284 = vsel %vm10220, %v10155, %v8278
  %v10286 = vsel %vm10220, %v10157, %v8280
  %v10288 = vsel %vm10220, %v10159, %v8282
  %v10290 = vsel %vm10220, %v10161, %v8284
  %v10292 = vsel %vm10220, %v10163, %v8286
  %v10294 = vsel %vm10220, %v10165, %v8288
  %v10296 = vsel %vm10220, %v10167, %v8290
  %v10298 = vsel %vm10220, %v10169, %v8292
  %v10300 = vsel %vm10220, %v10171, %v8294
  %v10302 = vsel %vm10220, %v10173, %v8296
  %v10304 = vsel %vm10220, %v10175, %v8298
  %v10306 = vsel %vm10220, %v10177, %v8300
  %v10308 = vsel %vm10220, %v10179, %v8302
  %v10310 = vsel %vm10220, %v10181, %v8304
  %v10312 = vsel %vm10220, %v10183, %v8306
  %v10314 = vsel %vm10220, %v10185, %v8308
  %v10316 = vsel %vm10220, %v10187, %v8310
  %v10318 = vsel %vm10220, %v10189, %v8312
  %v10320 = vsel %vm10220, %v10191, %v8314
  %v10322 = vsel %vm10220, %v10193, %v8316
  %v10324 = vsel %vm10220, %v10195, %v8318
  %v10326 = vsel %vm10220, %v10197, %v8320
  %v10328 = vsel %vm10220, %v10199, %v8322
  %v10330 = vsel %vm10220, %v10201, %v8324
  %v10332 = vsel %vm10220, %v10203, %v8326
  %v10334 = vsel %vm10220, %v10205, %v8328
  %v10336 = vsel %vm10220, %v10207, %v8330
  %v10338 = vsel %vm10220, %v10209, %v8332
  %v10340 = vsel %vm10220, %v10211, %v8334
  %v10342 = vsel %vm10220, %v10213, %v8336
  %v10344 = vsel %vm10220, %v10215, %v8338
  %v10346 = vsel %vm10220, %v10217, %v8340
  %v10348 = vsel %vm10220, %v10219, %v8342
  %vm10349 = vcmask 359424
  %v10351 = vsel %vm10349, %v10222, %v8352
  %v10353 = vsel %vm10349, %v10224, %v8354
  %v10355 = vsel %vm10349, %v10226, %v8356
  %v10357 = vsel %vm10349, %v10228, %v8358
  %v10359 = vsel %vm10349, %v10230, %v8360
  %v10361 = vsel %vm10349, %v10232, %v8362
  %v10363 = vsel %vm10349, %v10234, %v8364
  %v10365 = vsel %vm10349, %v10236, %v8366
  %v10367 = vsel %vm10349, %v10238, %v8368
  %v10369 = vsel %vm10349, %v10240, %v8370
  %v10371 = vsel %vm10349, %v10242, %v8372
  %v10373 = vsel %vm10349, %v10244, %v8374
  %v10375 = vsel %vm10349, %v10246, %v8376
  %v10377 = vsel %vm10349, %v10248, %v8378
  %v10379 = vsel %vm10349, %v10250, %v8380
  %v10381 = vsel %vm10349, %v10252, %v8382
  %v10383 = vsel %vm10349, %v10254, %v8384
  %v10385 = vsel %vm10349, %v10256, %v8386
  %v10387 = vsel %vm10349, %v10258, %v8388
  %v10389 = vsel %vm10349, %v10260, %v8390
  %v10391 = vsel %vm10349, %v10262, %v8392
  %v10393 = vsel %vm10349, %v10264, %v8394
  %v10395 = vsel %vm10349, %v10266, %v8396
  %v10397 = vsel %vm10349, %v10268, %v8398
  %v10399 = vsel %vm10349, %v10270, %v8400
  %v10401 = vsel %vm10349, %v10272, %v8402
  %v10403 = vsel %vm10349, %v10274, %v8404
  %v10405 = vsel %vm10349, %v10276, %v8406
  %v10407 = vsel %vm10349, %v10278, %v8408
  %v10409 = vsel %vm10349, %v10280, %v8410
  %v10411 = vsel %vm10349, %v10282, %v8412
  %v10413 = vsel %vm10349, %v10284, %v8414
  %v10415 = vsel %vm10349, %v10286, %v8416
  %v10417 = vsel %vm10349, %v10288, %v8418
  %v10419 = vsel %vm10349, %v10290, %v8420
  %v10421 = vsel %vm10349, %v10292, %v8422
  %v10423 = vsel %vm10349, %v10294, %v8424
  %v10425 = vsel %vm10349, %v10296, %v8426
  %v10427 = vsel %vm10349, %v10298, %v8428
  %v10429 = vsel %vm10349, %v10300, %v8430
  %v10431 = vsel %vm10349, %v10302, %v8432
  %v10433 = vsel %vm10349, %v10304, %v8434
  %v10435 = vsel %vm10349, %v10306, %v8436
  %v10437 = vsel %vm10349, %v10308, %v8438
  %v10439 = vsel %vm10349, %v10310, %v8440
  %v10441 = vsel %vm10349, %v10312, %v8442
  %v10443 = vsel %vm10349, %v10314, %v8444
  %v10445 = vsel %vm10349, %v10316, %v8446
  %v10447 = vsel %vm10349, %v10318, %v8448
  %v10449 = vsel %vm10349, %v10320, %v8450
  %v10451 = vsel %vm10349, %v10322, %v8452
  %v10453 = vsel %vm10349, %v10324, %v8454
  %v10455 = vsel %vm10349, %v10326, %v8456
  %v10457 = vsel %vm10349, %v10328, %v8458
  %v10459 = vsel %vm10349, %v10330, %v8460
  %v10461 = vsel %vm10349, %v10332, %v8462
  %v10463 = vsel %vm10349, %v10334, %v8464
  %v10465 = vsel %vm10349, %v10336, %v8466
  %v10467 = vsel %vm10349, %v10338, %v8468
  %v10469 = vsel %vm10349, %v10340, %v8470
  %v10471 = vsel %vm10349, %v10342, %v8472
  %v10473 = vsel %vm10349, %v10344, %v8474
  %v10475 = vsel %vm10349, %v10346, %v8476
  %v10477 = vsel %vm10349, %v10348, %v8478
  %10480 = vrot.lane.b32.xlu0 %v6333, 20
  %v10481 = vpop.permute.xlu0 %10480
  %10482 = vrot.lane.b32.xlu0 %v6345, 20
  %v10483 = vpop.permute.xlu0 %10482
  %10484 = vrot.lane.b32.xlu0 %v6357, 20
  %v10485 = vpop.permute.xlu0 %10484
  %10486 = vrot.lane.b32.xlu0 %v6369, 20
  %v10487 = vpop.permute.xlu0 %10486
  %10488 = vrot.lane.b32.xlu0 %v6381, 20
  %v10489 = vpop.permute.xlu0 %10488
  %10490 = vrot.lane.b32.xlu0 %v6386, 20
  %v10491 = vpop.permute.xlu0 %10490
  %10492 = vrot.lane.b32.xlu0 %v6387, 20
  %v10493 = vpop.permute.xlu0 %10492
  %10494 = vrot.lane.b32.xlu0 %v6388, 20
  %v10495 = vpop.permute.xlu0 %10494
  %10496 = vrot.lane.b32.xlu0 %v6389, 20
  %v10497 = vpop.permute.xlu0 %10496
  %10498 = vrot.lane.b32.xlu0 %v6390, 20
  %v10499 = vpop.permute.xlu0 %10498
  %10500 = vrot.lane.b32.xlu0 %v6391, 20
  %v10501 = vpop.permute.xlu0 %10500
  %10502 = vrot.lane.b32.xlu0 %v6392, 20
  %v10503 = vpop.permute.xlu0 %10502
  %10504 = vrot.lane.b32.xlu0 %v6393, 20
  %v10505 = vpop.permute.xlu0 %10504
  %10506 = vrot.lane.b32.xlu0 %v6398, 20
  %v10507 = vpop.permute.xlu0 %10506
  %10508 = vrot.lane.b32.xlu0 %v6399, 20
  %v10509 = vpop.permute.xlu0 %10508
  %10510 = vrot.lane.b32.xlu0 %v6400, 20
  %v10511 = vpop.permute.xlu0 %10510
  %10512 = vrot.lane.b32.xlu0 %v6401, 20
  %v10513 = vpop.permute.xlu0 %10512
  %10514 = vrot.lane.b32.xlu0 %v6402, 20
  %v10515 = vpop.permute.xlu0 %10514
  %10516 = vrot.lane.b32.xlu0 %v6403, 20
  %v10517 = vpop.permute.xlu0 %10516
  %10518 = vrot.lane.b32.xlu0 %v6404, 20
  %v10519 = vpop.permute.xlu0 %10518
  %10520 = vrot.lane.b32.xlu0 %v6405, 20
  %v10521 = vpop.permute.xlu0 %10520
  %10522 = vrot.lane.b32.xlu0 %v6410, 20
  %v10523 = vpop.permute.xlu0 %10522
  %10524 = vrot.lane.b32.xlu0 %v6411, 20
  %v10525 = vpop.permute.xlu0 %10524
  %10526 = vrot.lane.b32.xlu0 %v6412, 20
  %v10527 = vpop.permute.xlu0 %10526
  %10528 = vrot.lane.b32.xlu0 %v6413, 20
  %v10529 = vpop.permute.xlu0 %10528
  %10530 = vrot.lane.b32.xlu0 %v6414, 20
  %v10531 = vpop.permute.xlu0 %10530
  %10532 = vrot.lane.b32.xlu0 %v6415, 20
  %v10533 = vpop.permute.xlu0 %10532
  %10534 = vrot.lane.b32.xlu0 %v6416, 20
  %v10535 = vpop.permute.xlu0 %10534
  %10536 = vrot.lane.b32.xlu0 %v6417, 20
  %v10537 = vpop.permute.xlu0 %10536
  %10539 = vrot.lane.b32.xlu0 %v6334, 40
  %v10540 = vpop.permute.xlu0 %10539
  %10541 = vrot.lane.b32.xlu0 %v6346, 40
  %v10542 = vpop.permute.xlu0 %10541
  %10543 = vrot.lane.b32.xlu0 %v6358, 40
  %v10544 = vpop.permute.xlu0 %10543
  %10545 = vrot.lane.b32.xlu0 %v6370, 40
  %v10546 = vpop.permute.xlu0 %10545
  %10547 = vrot.lane.b32.xlu0 %v6382, 40
  %v10548 = vpop.permute.xlu0 %10547
  %10549 = vrot.lane.b32.xlu0 %v6387, 40
  %v10550 = vpop.permute.xlu0 %10549
  %10551 = vrot.lane.b32.xlu0 %v6388, 40
  %v10552 = vpop.permute.xlu0 %10551
  %10553 = vrot.lane.b32.xlu0 %v6389, 40
  %v10554 = vpop.permute.xlu0 %10553
  %10555 = vrot.lane.b32.xlu0 %v6390, 40
  %v10556 = vpop.permute.xlu0 %10555
  %10557 = vrot.lane.b32.xlu0 %v6391, 40
  %v10558 = vpop.permute.xlu0 %10557
  %10559 = vrot.lane.b32.xlu0 %v6392, 40
  %v10560 = vpop.permute.xlu0 %10559
  %10561 = vrot.lane.b32.xlu0 %v6393, 40
  %v10562 = vpop.permute.xlu0 %10561
  %10563 = vrot.lane.b32.xlu0 %v6394, 40
  %v10564 = vpop.permute.xlu0 %10563
  %10565 = vrot.lane.b32.xlu0 %v6399, 40
  %v10566 = vpop.permute.xlu0 %10565
  %10567 = vrot.lane.b32.xlu0 %v6400, 40
  %v10568 = vpop.permute.xlu0 %10567
  %10569 = vrot.lane.b32.xlu0 %v6401, 40
  %v10570 = vpop.permute.xlu0 %10569
  %10571 = vrot.lane.b32.xlu0 %v6402, 40
  %v10572 = vpop.permute.xlu0 %10571
  %10573 = vrot.lane.b32.xlu0 %v6403, 40
  %v10574 = vpop.permute.xlu0 %10573
  %10575 = vrot.lane.b32.xlu0 %v6404, 40
  %v10576 = vpop.permute.xlu0 %10575
  %10577 = vrot.lane.b32.xlu0 %v6405, 40
  %v10578 = vpop.permute.xlu0 %10577
  %10579 = vrot.lane.b32.xlu0 %v6406, 40
  %v10580 = vpop.permute.xlu0 %10579
  %10581 = vrot.lane.b32.xlu0 %v6411, 40
  %v10582 = vpop.permute.xlu0 %10581
  %10583 = vrot.lane.b32.xlu0 %v6412, 40
  %v10584 = vpop.permute.xlu0 %10583
  %10585 = vrot.lane.b32.xlu0 %v6413, 40
  %v10586 = vpop.permute.xlu0 %10585
  %10587 = vrot.lane.b32.xlu0 %v6414, 40
  %v10588 = vpop.permute.xlu0 %10587
  %10589 = vrot.lane.b32.xlu0 %v6415, 40
  %v10590 = vpop.permute.xlu0 %10589
  %10591 = vrot.lane.b32.xlu0 %v6416, 40
  %v10592 = vpop.permute.xlu0 %10591
  %10593 = vrot.lane.b32.xlu0 %v6417, 40
  %v10594 = vpop.permute.xlu0 %10593
  %10595 = vrot.lane.b32.xlu0 %v6418, 40
  %v10596 = vpop.permute.xlu0 %10595
  %10598 = vrot.lane.b32.xlu0 %v6335, 60
  %v10599 = vpop.permute.xlu0 %10598
  %10600 = vrot.lane.b32.xlu0 %v6347, 60
  %v10601 = vpop.permute.xlu0 %10600
  %10602 = vrot.lane.b32.xlu0 %v6359, 60
  %v10603 = vpop.permute.xlu0 %10602
  %10604 = vrot.lane.b32.xlu0 %v6371, 60
  %v10605 = vpop.permute.xlu0 %10604
  %10606 = vrot.lane.b32.xlu0 %v6383, 60
  %v10607 = vpop.permute.xlu0 %10606
  %10608 = vrot.lane.b32.xlu0 %v6388, 60
  %v10609 = vpop.permute.xlu0 %10608
  %10610 = vrot.lane.b32.xlu0 %v6389, 60
  %v10611 = vpop.permute.xlu0 %10610
  %10612 = vrot.lane.b32.xlu0 %v6390, 60
  %v10613 = vpop.permute.xlu0 %10612
  %10614 = vrot.lane.b32.xlu0 %v6391, 60
  %v10615 = vpop.permute.xlu0 %10614
  %10616 = vrot.lane.b32.xlu0 %v6392, 60
  %v10617 = vpop.permute.xlu0 %10616
  %10618 = vrot.lane.b32.xlu0 %v6393, 60
  %v10619 = vpop.permute.xlu0 %10618
  %10620 = vrot.lane.b32.xlu0 %v6394, 60
  %v10621 = vpop.permute.xlu0 %10620
  %10622 = vrot.lane.b32.xlu0 %v6395, 60
  %v10623 = vpop.permute.xlu0 %10622
  %10624 = vrot.lane.b32.xlu0 %v6400, 60
  %v10625 = vpop.permute.xlu0 %10624
  %10626 = vrot.lane.b32.xlu0 %v6401, 60
  %v10627 = vpop.permute.xlu0 %10626
  %10628 = vrot.lane.b32.xlu0 %v6402, 60
  %v10629 = vpop.permute.xlu0 %10628
  %10630 = vrot.lane.b32.xlu0 %v6403, 60
  %v10631 = vpop.permute.xlu0 %10630
  %10632 = vrot.lane.b32.xlu0 %v6404, 60
  %v10633 = vpop.permute.xlu0 %10632
  %10634 = vrot.lane.b32.xlu0 %v6405, 60
  %v10635 = vpop.permute.xlu0 %10634
  %10636 = vrot.lane.b32.xlu0 %v6406, 60
  %v10637 = vpop.permute.xlu0 %10636
  %10638 = vrot.lane.b32.xlu0 %v6407, 60
  %v10639 = vpop.permute.xlu0 %10638
  %10640 = vrot.lane.b32.xlu0 %v6412, 60
  %v10641 = vpop.permute.xlu0 %10640
  %10642 = vrot.lane.b32.xlu0 %v6413, 60
  %v10643 = vpop.permute.xlu0 %10642
  %10644 = vrot.lane.b32.xlu0 %v6414, 60
  %v10645 = vpop.permute.xlu0 %10644
  %10646 = vrot.lane.b32.xlu0 %v6415, 60
  %v10647 = vpop.permute.xlu0 %10646
  %10648 = vrot.lane.b32.xlu0 %v6416, 60
  %v10649 = vpop.permute.xlu0 %10648
  %10650 = vrot.lane.b32.xlu0 %v6417, 60
  %v10651 = vpop.permute.xlu0 %10650
  %10652 = vrot.lane.b32.xlu0 %v6418, 60
  %v10653 = vpop.permute.xlu0 %10652
  %10654 = vrot.lane.b32.xlu0 %v6419, 60
  %v10655 = vpop.permute.xlu0 %10654
  %10664 = vrot.lane.b32.xlu0 %v6336, 80
  %v10665 = vpop.permute.xlu0 %10664
  %10666 = vrot.lane.b32.xlu0 %v6337, 80
  %v10667 = vpop.permute.xlu0 %10666
  %10668 = vrot.lane.b32.xlu0 %v6338, 80
  %v10669 = vpop.permute.xlu0 %10668
  %10670 = vrot.lane.b32.xlu0 %v6339, 80
  %v10671 = vpop.permute.xlu0 %10670
  %10672 = vrot.lane.b32.xlu0 %v6348, 80
  %v10673 = vpop.permute.xlu0 %10672
  %10674 = vrot.lane.b32.xlu0 %v6349, 80
  %v10675 = vpop.permute.xlu0 %10674
  %10676 = vrot.lane.b32.xlu0 %v6350, 80
  %v10677 = vpop.permute.xlu0 %10676
  %10678 = vrot.lane.b32.xlu0 %v6351, 80
  %v10679 = vpop.permute.xlu0 %10678
  %10680 = vrot.lane.b32.xlu0 %v6360, 80
  %v10681 = vpop.permute.xlu0 %10680
  %10682 = vrot.lane.b32.xlu0 %v6361, 80
  %v10683 = vpop.permute.xlu0 %10682
  %10684 = vrot.lane.b32.xlu0 %v6362, 80
  %v10685 = vpop.permute.xlu0 %10684
  %10686 = vrot.lane.b32.xlu0 %v6363, 80
  %v10687 = vpop.permute.xlu0 %10686
  %10688 = vrot.lane.b32.xlu0 %v6372, 80
  %v10689 = vpop.permute.xlu0 %10688
  %10690 = vrot.lane.b32.xlu0 %v6373, 80
  %v10691 = vpop.permute.xlu0 %10690
  %10692 = vrot.lane.b32.xlu0 %v6374, 80
  %v10693 = vpop.permute.xlu0 %10692
  %10694 = vrot.lane.b32.xlu0 %v6375, 80
  %v10695 = vpop.permute.xlu0 %10694
  %10696 = vrot.lane.b32.xlu0 %v6384, 80
  %v10697 = vpop.permute.xlu0 %10696
  %10698 = vrot.lane.b32.xlu0 %v6385, 80
  %v10699 = vpop.permute.xlu0 %10698
  %10700 = vrot.lane.b32.xlu0 %v6386, 80
  %v10701 = vpop.permute.xlu0 %10700
  %10702 = vrot.lane.b32.xlu0 %v6387, 80
  %v10703 = vpop.permute.xlu0 %10702
  %10704 = vrot.lane.b32.xlu0 %v6388, 80
  %v10705 = vpop.permute.xlu0 %10704
  %10706 = vrot.lane.b32.xlu0 %v6389, 80
  %v10707 = vpop.permute.xlu0 %10706
  %10708 = vrot.lane.b32.xlu0 %v6390, 80
  %v10709 = vpop.permute.xlu0 %10708
  %10710 = vrot.lane.b32.xlu0 %v6391, 80
  %v10711 = vpop.permute.xlu0 %10710
  %10712 = vrot.lane.b32.xlu0 %v6396, 80
  %v10713 = vpop.permute.xlu0 %10712
  %10714 = vrot.lane.b32.xlu0 %v6397, 80
  %v10715 = vpop.permute.xlu0 %10714
  %10716 = vrot.lane.b32.xlu0 %v6398, 80
  %v10717 = vpop.permute.xlu0 %10716
  %10718 = vrot.lane.b32.xlu0 %v6399, 80
  %v10719 = vpop.permute.xlu0 %10718
  %10720 = vrot.lane.b32.xlu0 %v6400, 80
  %v10721 = vpop.permute.xlu0 %10720
  %10722 = vrot.lane.b32.xlu0 %v6401, 80
  %v10723 = vpop.permute.xlu0 %10722
  %10724 = vrot.lane.b32.xlu0 %v6402, 80
  %v10725 = vpop.permute.xlu0 %10724
  %10726 = vrot.lane.b32.xlu0 %v6403, 80
  %v10727 = vpop.permute.xlu0 %10726
  %10728 = vrot.lane.b32.xlu0 %v6408, 80
  %v10729 = vpop.permute.xlu0 %10728
  %10730 = vrot.lane.b32.xlu0 %v6409, 80
  %v10731 = vpop.permute.xlu0 %10730
  %10732 = vrot.lane.b32.xlu0 %v6410, 80
  %v10733 = vpop.permute.xlu0 %10732
  %10734 = vrot.lane.b32.xlu0 %v6411, 80
  %v10735 = vpop.permute.xlu0 %10734
  %10736 = vrot.lane.b32.xlu0 %v6412, 80
  %v10737 = vpop.permute.xlu0 %10736
  %10738 = vrot.lane.b32.xlu0 %v6413, 80
  %v10739 = vpop.permute.xlu0 %10738
  %10740 = vrot.lane.b32.xlu0 %v6414, 80
  %v10741 = vpop.permute.xlu0 %10740
  %10742 = vrot.lane.b32.xlu0 %v6415, 80
  %v10743 = vpop.permute.xlu0 %10742
  %10744 = vrot.lane.b32.xlu0 %v6420, 80
  %v10745 = vpop.permute.xlu0 %10744
  %10746 = vrot.lane.b32.xlu0 %v6421, 80
  %v10747 = vpop.permute.xlu0 %10746
  %10748 = vrot.lane.b32.xlu0 %v6422, 80
  %v10749 = vpop.permute.xlu0 %10748
  %10750 = vrot.lane.b32.xlu0 %v6423, 80
  %v10751 = vpop.permute.xlu0 %10750
  %10752 = vrot.lane.b32.xlu0 %v6424, 80
  %v10753 = vpop.permute.xlu0 %10752
  %10754 = vrot.lane.b32.xlu0 %v6425, 80
  %v10755 = vpop.permute.xlu0 %10754
  %10756 = vrot.lane.b32.xlu0 %v6426, 80
  %v10757 = vpop.permute.xlu0 %10756
  %10758 = vrot.lane.b32.xlu0 %v6427, 80
  %v10759 = vpop.permute.xlu0 %10758
  %10761 = vrot.lane.b32.xlu0 %v6344, 100
  %v10762 = vpop.permute.xlu0 %10761
  %10763 = vrot.lane.b32.xlu0 %v6356, 100
  %v10764 = vpop.permute.xlu0 %10763
  %10765 = vrot.lane.b32.xlu0 %v6368, 100
  %v10766 = vpop.permute.xlu0 %10765
  %10767 = vrot.lane.b32.xlu0 %v6380, 100
  %v10768 = vpop.permute.xlu0 %10767
  %10769 = vrot.lane.b32.xlu0 %v6392, 100
  %v10770 = vpop.permute.xlu0 %10769
  %10771 = vrot.lane.b32.xlu0 %v6397, 100
  %v10772 = vpop.permute.xlu0 %10771
  %10773 = vrot.lane.b32.xlu0 %v6398, 100
  %v10774 = vpop.permute.xlu0 %10773
  %10775 = vrot.lane.b32.xlu0 %v6399, 100
  %v10776 = vpop.permute.xlu0 %10775
  %10777 = vrot.lane.b32.xlu0 %v6400, 100
  %v10778 = vpop.permute.xlu0 %10777
  %10779 = vrot.lane.b32.xlu0 %v6401, 100
  %v10780 = vpop.permute.xlu0 %10779
  %10781 = vrot.lane.b32.xlu0 %v6402, 100
  %v10782 = vpop.permute.xlu0 %10781
  %10783 = vrot.lane.b32.xlu0 %v6403, 100
  %v10784 = vpop.permute.xlu0 %10783
  %10785 = vrot.lane.b32.xlu0 %v6404, 100
  %v10786 = vpop.permute.xlu0 %10785
  %10787 = vrot.lane.b32.xlu0 %v6409, 100
  %v10788 = vpop.permute.xlu0 %10787
  %10789 = vrot.lane.b32.xlu0 %v6410, 100
  %v10790 = vpop.permute.xlu0 %10789
  %10791 = vrot.lane.b32.xlu0 %v6411, 100
  %v10792 = vpop.permute.xlu0 %10791
  %10793 = vrot.lane.b32.xlu0 %v6412, 100
  %v10794 = vpop.permute.xlu0 %10793
  %10795 = vrot.lane.b32.xlu0 %v6413, 100
  %v10796 = vpop.permute.xlu0 %10795
  %10797 = vrot.lane.b32.xlu0 %v6414, 100
  %v10798 = vpop.permute.xlu0 %10797
  %10799 = vrot.lane.b32.xlu0 %v6415, 100
  %v10800 = vpop.permute.xlu0 %10799
  %10801 = vrot.lane.b32.xlu0 %v6416, 100
  %v10802 = vpop.permute.xlu0 %10801
  %10803 = vrot.lane.b32.xlu0 %v6421, 100
  %v10804 = vpop.permute.xlu0 %10803
  %10805 = vrot.lane.b32.xlu0 %v6422, 100
  %v10806 = vpop.permute.xlu0 %10805
  %10807 = vrot.lane.b32.xlu0 %v6423, 100
  %v10808 = vpop.permute.xlu0 %10807
  %10809 = vrot.lane.b32.xlu0 %v6424, 100
  %v10810 = vpop.permute.xlu0 %10809
  %10811 = vrot.lane.b32.xlu0 %v6425, 100
  %v10812 = vpop.permute.xlu0 %10811
  %10813 = vrot.lane.b32.xlu0 %v6426, 100
  %v10814 = vpop.permute.xlu0 %10813
  %10815 = vrot.lane.b32.xlu0 %v6427, 100
  %v10816 = vpop.permute.xlu0 %10815
  %10817 = vrot.lane.b32.xlu0 %v6428, 100
  %v10818 = vpop.permute.xlu0 %10817
  %10820 = vrot.lane.b32.xlu0 %v6345, 120
  %v10821 = vpop.permute.xlu0 %10820
  %10822 = vrot.lane.b32.xlu0 %v6357, 120
  %v10823 = vpop.permute.xlu0 %10822
  %10824 = vrot.lane.b32.xlu0 %v6369, 120
  %v10825 = vpop.permute.xlu0 %10824
  %10826 = vrot.lane.b32.xlu0 %v6381, 120
  %v10827 = vpop.permute.xlu0 %10826
  %10828 = vrot.lane.b32.xlu0 %v6393, 120
  %v10829 = vpop.permute.xlu0 %10828
  %10830 = vrot.lane.b32.xlu0 %v6398, 120
  %v10831 = vpop.permute.xlu0 %10830
  %10832 = vrot.lane.b32.xlu0 %v6399, 120
  %v10833 = vpop.permute.xlu0 %10832
  %10834 = vrot.lane.b32.xlu0 %v6400, 120
  %v10835 = vpop.permute.xlu0 %10834
  %10836 = vrot.lane.b32.xlu0 %v6401, 120
  %v10837 = vpop.permute.xlu0 %10836
  %10838 = vrot.lane.b32.xlu0 %v6402, 120
  %v10839 = vpop.permute.xlu0 %10838
  %10840 = vrot.lane.b32.xlu0 %v6403, 120
  %v10841 = vpop.permute.xlu0 %10840
  %10842 = vrot.lane.b32.xlu0 %v6404, 120
  %v10843 = vpop.permute.xlu0 %10842
  %10844 = vrot.lane.b32.xlu0 %v6405, 120
  %v10845 = vpop.permute.xlu0 %10844
  %10846 = vrot.lane.b32.xlu0 %v6410, 120
  %v10847 = vpop.permute.xlu0 %10846
  %10848 = vrot.lane.b32.xlu0 %v6411, 120
  %v10849 = vpop.permute.xlu0 %10848
  %10850 = vrot.lane.b32.xlu0 %v6412, 120
  %v10851 = vpop.permute.xlu0 %10850
  %10852 = vrot.lane.b32.xlu0 %v6413, 120
  %v10853 = vpop.permute.xlu0 %10852
  %10854 = vrot.lane.b32.xlu0 %v6414, 120
  %v10855 = vpop.permute.xlu0 %10854
  %10856 = vrot.lane.b32.xlu0 %v6415, 120
  %v10857 = vpop.permute.xlu0 %10856
  %10858 = vrot.lane.b32.xlu0 %v6416, 120
  %v10859 = vpop.permute.xlu0 %10858
  %10860 = vrot.lane.b32.xlu0 %v6417, 120
  %v10861 = vpop.permute.xlu0 %10860
  %10862 = vrot.lane.b32.xlu0 %v6422, 120
  %v10863 = vpop.permute.xlu0 %10862
  %10864 = vrot.lane.b32.xlu0 %v6423, 120
  %v10865 = vpop.permute.xlu0 %10864
  %10866 = vrot.lane.b32.xlu0 %v6424, 120
  %v10867 = vpop.permute.xlu0 %10866
  %10868 = vrot.lane.b32.xlu0 %v6425, 120
  %v10869 = vpop.permute.xlu0 %10868
  %10870 = vrot.lane.b32.xlu0 %v6426, 120
  %v10871 = vpop.permute.xlu0 %10870
  %10872 = vrot.lane.b32.xlu0 %v6427, 120
  %v10873 = vpop.permute.xlu0 %10872
  %10874 = vrot.lane.b32.xlu0 %v6428, 120
  %v10875 = vpop.permute.xlu0 %10874
  %10876 = vrot.lane.b32.xlu0 %v6429, 120
  %v10877 = vpop.permute.xlu0 %10876
  %10879 = vrot.lane.b32.xlu0 %v6346, 12
  %v10880 = vpop.permute.xlu0 %10879
  %10881 = vrot.lane.b32.xlu0 %v6358, 12
  %v10882 = vpop.permute.xlu0 %10881
  %10883 = vrot.lane.b32.xlu0 %v6370, 12
  %v10884 = vpop.permute.xlu0 %10883
  %10885 = vrot.lane.b32.xlu0 %v6382, 12
  %v10886 = vpop.permute.xlu0 %10885
  %10887 = vrot.lane.b32.xlu0 %v6394, 12
  %v10888 = vpop.permute.xlu0 %10887
  %10889 = vrot.lane.b32.xlu0 %v6399, 12
  %v10890 = vpop.permute.xlu0 %10889
  %10891 = vrot.lane.b32.xlu0 %v6400, 12
  %v10892 = vpop.permute.xlu0 %10891
  %10893 = vrot.lane.b32.xlu0 %v6401, 12
  %v10894 = vpop.permute.xlu0 %10893
  %10895 = vrot.lane.b32.xlu0 %v6402, 12
  %v10896 = vpop.permute.xlu0 %10895
  %10897 = vrot.lane.b32.xlu0 %v6403, 12
  %v10898 = vpop.permute.xlu0 %10897
  %10899 = vrot.lane.b32.xlu0 %v6404, 12
  %v10900 = vpop.permute.xlu0 %10899
  %10901 = vrot.lane.b32.xlu0 %v6405, 12
  %v10902 = vpop.permute.xlu0 %10901
  %10903 = vrot.lane.b32.xlu0 %v6406, 12
  %v10904 = vpop.permute.xlu0 %10903
  %10905 = vrot.lane.b32.xlu0 %v6411, 12
  %v10906 = vpop.permute.xlu0 %10905
  %10907 = vrot.lane.b32.xlu0 %v6412, 12
  %v10908 = vpop.permute.xlu0 %10907
  %10909 = vrot.lane.b32.xlu0 %v6413, 12
  %v10910 = vpop.permute.xlu0 %10909
  %10911 = vrot.lane.b32.xlu0 %v6414, 12
  %v10912 = vpop.permute.xlu0 %10911
  %10913 = vrot.lane.b32.xlu0 %v6415, 12
  %v10914 = vpop.permute.xlu0 %10913
  %10915 = vrot.lane.b32.xlu0 %v6416, 12
  %v10916 = vpop.permute.xlu0 %10915
  %10917 = vrot.lane.b32.xlu0 %v6417, 12
  %v10918 = vpop.permute.xlu0 %10917
  %10919 = vrot.lane.b32.xlu0 %v6418, 12
  %v10920 = vpop.permute.xlu0 %10919
  %10921 = vrot.lane.b32.xlu0 %v6423, 12
  %v10922 = vpop.permute.xlu0 %10921
  %10923 = vrot.lane.b32.xlu0 %v6424, 12
  %v10924 = vpop.permute.xlu0 %10923
  %10925 = vrot.lane.b32.xlu0 %v6425, 12
  %v10926 = vpop.permute.xlu0 %10925
  %10927 = vrot.lane.b32.xlu0 %v6426, 12
  %v10928 = vpop.permute.xlu0 %10927
  %10929 = vrot.lane.b32.xlu0 %v6427, 12
  %v10930 = vpop.permute.xlu0 %10929
  %10931 = vrot.lane.b32.xlu0 %v6428, 12
  %v10932 = vpop.permute.xlu0 %10931
  %10933 = vrot.lane.b32.xlu0 %v6429, 12
  %v10934 = vpop.permute.xlu0 %10933
  %10935 = vrot.lane.b32.xlu0 %v6430, 12
  %v10936 = vpop.permute.xlu0 %10935
  %10938 = vrot.lane.b32.xlu0 %v6347, 32
  %v10939 = vpop.permute.xlu0 %10938
  %10940 = vrot.lane.b32.xlu0 %v6359, 32
  %v10941 = vpop.permute.xlu0 %10940
  %10942 = vrot.lane.b32.xlu0 %v6371, 32
  %v10943 = vpop.permute.xlu0 %10942
  %10944 = vrot.lane.b32.xlu0 %v6383, 32
  %v10945 = vpop.permute.xlu0 %10944
  %10946 = vrot.lane.b32.xlu0 %v6395, 32
  %v10947 = vpop.permute.xlu0 %10946
  %10948 = vrot.lane.b32.xlu0 %v6400, 32
  %v10949 = vpop.permute.xlu0 %10948
  %10950 = vrot.lane.b32.xlu0 %v6401, 32
  %v10951 = vpop.permute.xlu0 %10950
  %10952 = vrot.lane.b32.xlu0 %v6402, 32
  %v10953 = vpop.permute.xlu0 %10952
  %10954 = vrot.lane.b32.xlu0 %v6403, 32
  %v10955 = vpop.permute.xlu0 %10954
  %10956 = vrot.lane.b32.xlu0 %v6404, 32
  %v10957 = vpop.permute.xlu0 %10956
  %10958 = vrot.lane.b32.xlu0 %v6405, 32
  %v10959 = vpop.permute.xlu0 %10958
  %10960 = vrot.lane.b32.xlu0 %v6406, 32
  %v10961 = vpop.permute.xlu0 %10960
  %10962 = vrot.lane.b32.xlu0 %v6407, 32
  %v10963 = vpop.permute.xlu0 %10962
  %10964 = vrot.lane.b32.xlu0 %v6412, 32
  %v10965 = vpop.permute.xlu0 %10964
  %10966 = vrot.lane.b32.xlu0 %v6413, 32
  %v10967 = vpop.permute.xlu0 %10966
  %10968 = vrot.lane.b32.xlu0 %v6414, 32
  %v10969 = vpop.permute.xlu0 %10968
  %10970 = vrot.lane.b32.xlu0 %v6415, 32
  %v10971 = vpop.permute.xlu0 %10970
  %10972 = vrot.lane.b32.xlu0 %v6416, 32
  %v10973 = vpop.permute.xlu0 %10972
  %10974 = vrot.lane.b32.xlu0 %v6417, 32
  %v10975 = vpop.permute.xlu0 %10974
  %10976 = vrot.lane.b32.xlu0 %v6418, 32
  %v10977 = vpop.permute.xlu0 %10976
  %10978 = vrot.lane.b32.xlu0 %v6419, 32
  %v10979 = vpop.permute.xlu0 %10978
  %10980 = vrot.lane.b32.xlu0 %v6424, 32
  %v10981 = vpop.permute.xlu0 %10980
  %10982 = vrot.lane.b32.xlu0 %v6425, 32
  %v10983 = vpop.permute.xlu0 %10982
  %10984 = vrot.lane.b32.xlu0 %v6426, 32
  %v10985 = vpop.permute.xlu0 %10984
  %10986 = vrot.lane.b32.xlu0 %v6427, 32
  %v10987 = vpop.permute.xlu0 %10986
  %10988 = vrot.lane.b32.xlu0 %v6428, 32
  %v10989 = vpop.permute.xlu0 %10988
  %10990 = vrot.lane.b32.xlu0 %v6429, 32
  %v10991 = vpop.permute.xlu0 %10990
  %10992 = vrot.lane.b32.xlu0 %v6430, 32
  %v10993 = vpop.permute.xlu0 %10992
  %10994 = vrot.lane.b32.xlu0 %v6431, 32
  %v10995 = vpop.permute.xlu0 %10994
  %v10998 = vsel %vm8479, %v6332, %v10481
  %v11001 = vsel %vm8479, %v6344, %v10483
  %v11004 = vsel %vm8479, %v6356, %v10485
  %v11007 = vsel %vm8479, %v6368, %v10487
  %v11010 = vsel %vm8479, %v6380, %v10489
  %v11013 = vsel %vm8479, %v6385, %v10491
  %v11016 = vsel %vm8479, %v6386, %v10493
  %v11019 = vsel %vm8479, %v6387, %v10495
  %v11022 = vsel %vm8479, %v6388, %v10497
  %v11025 = vsel %vm8479, %v6389, %v10499
  %v11028 = vsel %vm8479, %v6390, %v10501
  %v11031 = vsel %vm8479, %v6391, %v10503
  %v11034 = vsel %vm8479, %v6392, %v10505
  %v11037 = vsel %vm8479, %v6397, %v10507
  %v11040 = vsel %vm8479, %v6398, %v10509
  %v11043 = vsel %vm8479, %v6399, %v10511
  %v11046 = vsel %vm8479, %v6400, %v10513
  %v11049 = vsel %vm8479, %v6401, %v10515
  %v11052 = vsel %vm8479, %v6402, %v10517
  %v11055 = vsel %vm8479, %v6403, %v10519
  %v11058 = vsel %vm8479, %v6404, %v10521
  %v11061 = vsel %vm8479, %v6409, %v10523
  %v11064 = vsel %vm8479, %v6410, %v10525
  %v11067 = vsel %vm8479, %v6411, %v10527
  %v11070 = vsel %vm8479, %v6412, %v10529
  %v11073 = vsel %vm8479, %v6413, %v10531
  %v11076 = vsel %vm8479, %v6414, %v10533
  %v11079 = vsel %vm8479, %v6415, %v10535
  %v11082 = vsel %vm8479, %v6416, %v10537
  %v11084 = vsel %vm8672, %v10998, %v10540
  %v11086 = vsel %vm8672, %v11001, %v10542
  %v11088 = vsel %vm8672, %v11004, %v10544
  %v11090 = vsel %vm8672, %v11007, %v10546
  %v11092 = vsel %vm8672, %v11010, %v10548
  %v11094 = vsel %vm8672, %v11013, %v10550
  %v11096 = vsel %vm8672, %v11016, %v10552
  %v11098 = vsel %vm8672, %v11019, %v10554
  %v11100 = vsel %vm8672, %v11022, %v10556
  %v11102 = vsel %vm8672, %v11025, %v10558
  %v11104 = vsel %vm8672, %v11028, %v10560
  %v11106 = vsel %vm8672, %v11031, %v10562
  %v11108 = vsel %vm8672, %v11034, %v10564
  %v11110 = vsel %vm8672, %v11037, %v10566
  %v11112 = vsel %vm8672, %v11040, %v10568
  %v11114 = vsel %vm8672, %v11043, %v10570
  %v11116 = vsel %vm8672, %v11046, %v10572
  %v11118 = vsel %vm8672, %v11049, %v10574
  %v11120 = vsel %vm8672, %v11052, %v10576
  %v11122 = vsel %vm8672, %v11055, %v10578
  %v11124 = vsel %vm8672, %v11058, %v10580
  %v11126 = vsel %vm8672, %v11061, %v10582
  %v11128 = vsel %vm8672, %v11064, %v10584
  %v11130 = vsel %vm8672, %v11067, %v10586
  %v11132 = vsel %vm8672, %v11070, %v10588
  %v11134 = vsel %vm8672, %v11073, %v10590
  %v11136 = vsel %vm8672, %v11076, %v10592
  %v11138 = vsel %vm8672, %v11079, %v10594
  %v11140 = vsel %vm8672, %v11082, %v10596
  %v11142 = vsel %vm8801, %v11084, %v10599
  %v11144 = vsel %vm8801, %v11086, %v10601
  %v11146 = vsel %vm8801, %v11088, %v10603
  %v11148 = vsel %vm8801, %v11090, %v10605
  %v11150 = vsel %vm8801, %v11092, %v10607
  %v11152 = vsel %vm8801, %v11094, %v10609
  %v11154 = vsel %vm8801, %v11096, %v10611
  %v11156 = vsel %vm8801, %v11098, %v10613
  %v11158 = vsel %vm8801, %v11100, %v10615
  %v11160 = vsel %vm8801, %v11102, %v10617
  %v11162 = vsel %vm8801, %v11104, %v10619
  %v11164 = vsel %vm8801, %v11106, %v10621
  %v11166 = vsel %vm8801, %v11108, %v10623
  %v11168 = vsel %vm8801, %v11110, %v10625
  %v11170 = vsel %vm8801, %v11112, %v10627
  %v11172 = vsel %vm8801, %v11114, %v10629
  %v11174 = vsel %vm8801, %v11116, %v10631
  %v11176 = vsel %vm8801, %v11118, %v10633
  %v11178 = vsel %vm8801, %v11120, %v10635
  %v11180 = vsel %vm8801, %v11122, %v10637
  %v11182 = vsel %vm8801, %v11124, %v10639
  %v11184 = vsel %vm8801, %v11126, %v10641
  %v11186 = vsel %vm8801, %v11128, %v10643
  %v11188 = vsel %vm8801, %v11130, %v10645
  %v11190 = vsel %vm8801, %v11132, %v10647
  %v11192 = vsel %vm8801, %v11134, %v10649
  %v11194 = vsel %vm8801, %v11136, %v10651
  %v11196 = vsel %vm8801, %v11138, %v10653
  %v11198 = vsel %vm8801, %v11140, %v10655
  %v11200 = vsel %vm8930, %v8853, %v10665
  %v11202 = vsel %vm8930, %v8855, %v10667
  %v11204 = vsel %vm8930, %v8857, %v10669
  %v11206 = vsel %vm8930, %v8859, %v10671
  %v11207 = vsel %vm8930, %v8861, %v6969
  %v11208 = vsel %vm8930, %v8863, %v6971
  %v11209 = vsel %vm8930, %v8865, %v6973
  %v11210 = vsel %vm8930, %v11142, %v6975
  %v11212 = vsel %vm8930, %v8869, %v10673
  %v11214 = vsel %vm8930, %v8871, %v10675
  %v11216 = vsel %vm8930, %v8873, %v10677
  %v11218 = vsel %vm8930, %v8875, %v10679
  %v11219 = vsel %vm8930, %v8877, %v6985
  %v11220 = vsel %vm8930, %v8879, %v6987
  %v11221 = vsel %vm8930, %v8881, %v6989
  %v11222 = vsel %vm8930, %v11144, %v6991
  %v11224 = vsel %vm8930, %v8885, %v10681
  %v11226 = vsel %vm8930, %v8887, %v10683
  %v11228 = vsel %vm8930, %v8889, %v10685
  %v11230 = vsel %vm8930, %v8891, %v10687
  %v11231 = vsel %vm8930, %v8893, %v7001
  %v11232 = vsel %vm8930, %v8895, %v7003
  %v11233 = vsel %vm8930, %v8897, %v7005
  %v11234 = vsel %vm8930, %v11146, %v7007
  %v11236 = vsel %vm8930, %v8901, %v10689
  %v11238 = vsel %vm8930, %v8903, %v10691
  %v11240 = vsel %vm8930, %v8905, %v10693
  %v11242 = vsel %vm8930, %v8907, %v10695
  %v11243 = vsel %vm8930, %v8909, %v7017
  %v11244 = vsel %vm8930, %v8911, %v7019
  %v11245 = vsel %vm8930, %v8913, %v7021
  %v11246 = vsel %vm8930, %v11148, %v7023
  %v11248 = vsel %vm8930, %v8917, %v10697
  %v11250 = vsel %vm8930, %v8919, %v10699
  %v11252 = vsel %vm8930, %v8921, %v10701
  %v11254 = vsel %vm8930, %v8923, %v10703
  %v11256 = vsel %vm8930, %v8925, %v10705
  %v11258 = vsel %vm8930, %v8927, %v10707
  %v11260 = vsel %vm8930, %v8929, %v10709
  %v11262 = vsel %vm8930, %v11150, %v10711
  %v11264 = vsel %vm8930, %v11152, %v10713
  %v11266 = vsel %vm8930, %v11154, %v10715
  %v11268 = vsel %vm8930, %v11156, %v10717
  %v11270 = vsel %vm8930, %v11158, %v10719
  %v11272 = vsel %vm8930, %v11160, %v10721
  %v11274 = vsel %vm8930, %v11162, %v10723
  %v11276 = vsel %vm8930, %v11164, %v10725
  %v11278 = vsel %vm8930, %v11166, %v10727
  %v11280 = vsel %vm8930, %v11168, %v10729
  %v11282 = vsel %vm8930, %v11170, %v10731
  %v11284 = vsel %vm8930, %v11172, %v10733
  %v11286 = vsel %vm8930, %v11174, %v10735
  %v11288 = vsel %vm8930, %v11176, %v10737
  %v11290 = vsel %vm8930, %v11178, %v10739
  %v11292 = vsel %vm8930, %v11180, %v10741
  %v11294 = vsel %vm8930, %v11182, %v10743
  %v11296 = vsel %vm8930, %v11184, %v10745
  %v11298 = vsel %vm8930, %v11186, %v10747
  %v11300 = vsel %vm8930, %v11188, %v10749
  %v11302 = vsel %vm8930, %v11190, %v10751
  %v11304 = vsel %vm8930, %v11192, %v10753
  %v11306 = vsel %vm8930, %v11194, %v10755
  %v11308 = vsel %vm8930, %v11196, %v10757
  %v11310 = vsel %vm8930, %v11198, %v10759
  %v11311 = vsel %vm9059, %v11200, %v7098
  %v11312 = vsel %vm9059, %v11202, %v7100
  %v11313 = vsel %vm9059, %v11204, %v7102
  %v11314 = vsel %vm9059, %v11206, %v7104
  %v11315 = vsel %vm9059, %v11207, %v7106
  %v11316 = vsel %vm9059, %v11208, %v7108
  %v11317 = vsel %vm9059, %v11209, %v7110
  %v11319 = vsel %vm9059, %v11210, %v10762
  %v11320 = vsel %vm9059, %v11212, %v7114
  %v11321 = vsel %vm9059, %v11214, %v7116
  %v11322 = vsel %vm9059, %v11216, %v7118
  %v11323 = vsel %vm9059, %v11218, %v7120
  %v11324 = vsel %vm9059, %v11219, %v7122
  %v11325 = vsel %vm9059, %v11220, %v7124
  %v11326 = vsel %vm9059, %v11221, %v7126
  %v11328 = vsel %vm9059, %v11222, %v10764
  %v11329 = vsel %vm9059, %v11224, %v7130
  %v11330 = vsel %vm9059, %v11226, %v7132
  %v11331 = vsel %vm9059, %v11228, %v7134
  %v11332 = vsel %vm9059, %v11230, %v7136
  %v11333 = vsel %vm9059, %v11231, %v7138
  %v11334 = vsel %vm9059, %v11232, %v7140
  %v11335 = vsel %vm9059, %v11233, %v7142
  %v11337 = vsel %vm9059, %v11234, %v10766
  %v11338 = vsel %vm9059, %v11236, %v7146
  %v11339 = vsel %vm9059, %v11238, %v7148
  %v11340 = vsel %vm9059, %v11240, %v7150
  %v11341 = vsel %vm9059, %v11242, %v7152
  %v11342 = vsel %vm9059, %v11243, %v7154
  %v11343 = vsel %vm9059, %v11244, %v7156
  %v11344 = vsel %vm9059, %v11245, %v7158
  %v11346 = vsel %vm9059, %v11246, %v10768
  %v11347 = vsel %vm9059, %v11248, %v7162
  %v11348 = vsel %vm9059, %v11250, %v7164
  %v11349 = vsel %vm9059, %v11252, %v7166
  %v11350 = vsel %vm9059, %v11254, %v7168
  %v11351 = vsel %vm9059, %v11256, %v7170
  %v11352 = vsel %vm9059, %v11258, %v7172
  %v11353 = vsel %vm9059, %v11260, %v7174
  %v11355 = vsel %vm9059, %v11262, %v10770
  %v11357 = vsel %vm9059, %v11264, %v10772
  %v11359 = vsel %vm9059, %v11266, %v10774
  %v11361 = vsel %vm9059, %v11268, %v10776
  %v11363 = vsel %vm9059, %v11270, %v10778
  %v11365 = vsel %vm9059, %v11272, %v10780
  %v11367 = vsel %vm9059, %v11274, %v10782
  %v11369 = vsel %vm9059, %v11276, %v10784
  %v11371 = vsel %vm9059, %v11278, %v10786
  %v11373 = vsel %vm9059, %v11280, %v10788
  %v11375 = vsel %vm9059, %v11282, %v10790
  %v11377 = vsel %vm9059, %v11284, %v10792
  %v11379 = vsel %vm9059, %v11286, %v10794
  %v11381 = vsel %vm9059, %v11288, %v10796
  %v11383 = vsel %vm9059, %v11290, %v10798
  %v11385 = vsel %vm9059, %v11292, %v10800
  %v11387 = vsel %vm9059, %v11294, %v10802
  %v11389 = vsel %vm9059, %v11296, %v10804
  %v11391 = vsel %vm9059, %v11298, %v10806
  %v11393 = vsel %vm9059, %v11300, %v10808
  %v11395 = vsel %vm9059, %v11302, %v10810
  %v11397 = vsel %vm9059, %v11304, %v10812
  %v11399 = vsel %vm9059, %v11306, %v10814
  %v11401 = vsel %vm9059, %v11308, %v10816
  %v11403 = vsel %vm9059, %v11310, %v10818
  %v11404 = vsel %vm9188, %v11311, %v7227
  %v11405 = vsel %vm9188, %v11312, %v7229
  %v11406 = vsel %vm9188, %v11313, %v7231
  %v11407 = vsel %vm9188, %v11314, %v7233
  %v11408 = vsel %vm9188, %v11315, %v7235
  %v11409 = vsel %vm9188, %v11316, %v7237
  %v11410 = vsel %vm9188, %v11317, %v7239
  %v11412 = vsel %vm9188, %v11319, %v10821
  %v11413 = vsel %vm9188, %v11320, %v7243
  %v11414 = vsel %vm9188, %v11321, %v7245
  %v11415 = vsel %vm9188, %v11322, %v7247
  %v11416 = vsel %vm9188, %v11323, %v7249
  %v11417 = vsel %vm9188, %v11324, %v7251
  %v11418 = vsel %vm9188, %v11325, %v7253
  %v11419 = vsel %vm9188, %v11326, %v7255
  %v11421 = vsel %vm9188, %v11328, %v10823
  %v11422 = vsel %vm9188, %v11329, %v7259
  %v11423 = vsel %vm9188, %v11330, %v7261
  %v11424 = vsel %vm9188, %v11331, %v7263
  %v11425 = vsel %vm9188, %v11332, %v7265
  %v11426 = vsel %vm9188, %v11333, %v7267
  %v11427 = vsel %vm9188, %v11334, %v7269
  %v11428 = vsel %vm9188, %v11335, %v7271
  %v11430 = vsel %vm9188, %v11337, %v10825
  %v11431 = vsel %vm9188, %v11338, %v7275
  %v11432 = vsel %vm9188, %v11339, %v7277
  %v11433 = vsel %vm9188, %v11340, %v7279
  %v11434 = vsel %vm9188, %v11341, %v7281
  %v11435 = vsel %vm9188, %v11342, %v7283
  %v11436 = vsel %vm9188, %v11343, %v7285
  %v11437 = vsel %vm9188, %v11344, %v7287
  %v11439 = vsel %vm9188, %v11346, %v10827
  %v11440 = vsel %vm9188, %v11347, %v7291
  %v11441 = vsel %vm9188, %v11348, %v7293
  %v11442 = vsel %vm9188, %v11349, %v7295
  %v11443 = vsel %vm9188, %v11350, %v7297
  %v11444 = vsel %vm9188, %v11351, %v7299
  %v11445 = vsel %vm9188, %v11352, %v7301
  %v11446 = vsel %vm9188, %v11353, %v7303
  %v11448 = vsel %vm9188, %v11355, %v10829
  %v11450 = vsel %vm9188, %v11357, %v10831
  %v11452 = vsel %vm9188, %v11359, %v10833
  %v11454 = vsel %vm9188, %v11361, %v10835
  %v11456 = vsel %vm9188, %v11363, %v10837
  %v11458 = vsel %vm9188, %v11365, %v10839
  %v11460 = vsel %vm9188, %v11367, %v10841
  %v11462 = vsel %vm9188, %v11369, %v10843
  %v11464 = vsel %vm9188, %v11371, %v10845
  %v11466 = vsel %vm9188, %v11373, %v10847
  %v11468 = vsel %vm9188, %v11375, %v10849
  %v11470 = vsel %vm9188, %v11377, %v10851
  %v11472 = vsel %vm9188, %v11379, %v10853
  %v11474 = vsel %vm9188, %v11381, %v10855
  %v11476 = vsel %vm9188, %v11383, %v10857
  %v11478 = vsel %vm9188, %v11385, %v10859
  %v11480 = vsel %vm9188, %v11387, %v10861
  %v11482 = vsel %vm9188, %v11389, %v10863
  %v11484 = vsel %vm9188, %v11391, %v10865
  %v11486 = vsel %vm9188, %v11393, %v10867
  %v11488 = vsel %vm9188, %v11395, %v10869
  %v11490 = vsel %vm9188, %v11397, %v10871
  %v11492 = vsel %vm9188, %v11399, %v10873
  %v11494 = vsel %vm9188, %v11401, %v10875
  %v11496 = vsel %vm9188, %v11403, %v10877
  %v11498 = vsel %vm9317, %v10821, %v10880
  %v11500 = vsel %vm9317, %v10823, %v10882
  %v11502 = vsel %vm9317, %v10825, %v10884
  %v11504 = vsel %vm9317, %v10827, %v10886
  %v11506 = vsel %vm9317, %v10829, %v10888
  %v11508 = vsel %vm9317, %v10831, %v10890
  %v11510 = vsel %vm9317, %v10833, %v10892
  %v11512 = vsel %vm9317, %v10835, %v10894
  %v11514 = vsel %vm9317, %v10837, %v10896
  %v11516 = vsel %vm9317, %v10839, %v10898
  %v11518 = vsel %vm9317, %v10841, %v10900
  %v11520 = vsel %vm9317, %v10843, %v10902
  %v11522 = vsel %vm9317, %v10845, %v10904
  %v11524 = vsel %vm9317, %v10847, %v10906
  %v11526 = vsel %vm9317, %v10849, %v10908
  %v11528 = vsel %vm9317, %v10851, %v10910
  %v11530 = vsel %vm9317, %v10853, %v10912
  %v11532 = vsel %vm9317, %v10855, %v10914
  %v11534 = vsel %vm9317, %v10857, %v10916
  %v11536 = vsel %vm9317, %v10859, %v10918
  %v11538 = vsel %vm9317, %v10861, %v10920
  %v11540 = vsel %vm9317, %v10863, %v10922
  %v11542 = vsel %vm9317, %v10865, %v10924
  %v11544 = vsel %vm9317, %v10867, %v10926
  %v11546 = vsel %vm9317, %v10869, %v10928
  %v11548 = vsel %vm9317, %v10871, %v10930
  %v11550 = vsel %vm9317, %v10873, %v10932
  %v11552 = vsel %vm9317, %v10875, %v10934
  %v11554 = vsel %vm9317, %v10877, %v10936
  %v11556 = vsel %vm9446, %v11498, %v10939
  %v11558 = vsel %vm9446, %v11500, %v10941
  %v11560 = vsel %vm9446, %v11502, %v10943
  %v11562 = vsel %vm9446, %v11504, %v10945
  %v11564 = vsel %vm9446, %v11506, %v10947
  %v11566 = vsel %vm9446, %v11508, %v10949
  %v11568 = vsel %vm9446, %v11510, %v10951
  %v11570 = vsel %vm9446, %v11512, %v10953
  %v11572 = vsel %vm9446, %v11514, %v10955
  %v11574 = vsel %vm9446, %v11516, %v10957
  %v11576 = vsel %vm9446, %v11518, %v10959
  %v11578 = vsel %vm9446, %v11520, %v10961
  %v11580 = vsel %vm9446, %v11522, %v10963
  %v11582 = vsel %vm9446, %v11524, %v10965
  %v11584 = vsel %vm9446, %v11526, %v10967
  %v11586 = vsel %vm9446, %v11528, %v10969
  %v11588 = vsel %vm9446, %v11530, %v10971
  %v11590 = vsel %vm9446, %v11532, %v10973
  %v11592 = vsel %vm9446, %v11534, %v10975
  %v11594 = vsel %vm9446, %v11536, %v10977
  %v11596 = vsel %vm9446, %v11538, %v10979
  %v11598 = vsel %vm9446, %v11540, %v10981
  %v11600 = vsel %vm9446, %v11542, %v10983
  %v11602 = vsel %vm9446, %v11544, %v10985
  %v11604 = vsel %vm9446, %v11546, %v10987
  %v11606 = vsel %vm9446, %v11548, %v10989
  %v11608 = vsel %vm9446, %v11550, %v10991
  %v11610 = vsel %vm9446, %v11552, %v10993
  %v11612 = vsel %vm9446, %v11554, %v10995
  %11741 = vrot.lane.b32.xlu0 %v11404, 64
  %v11742 = vpop.permute.xlu0 %11741
  %11743 = vrot.lane.b32.xlu0 %v9498, 64
  %v11744 = vpop.permute.xlu0 %11743
  %11745 = vrot.lane.b32.xlu0 %v11405, 64
  %v11746 = vpop.permute.xlu0 %11745
  %11747 = vrot.lane.b32.xlu0 %v9500, 64
  %v11748 = vpop.permute.xlu0 %11747
  %11749 = vrot.lane.b32.xlu0 %v11406, 64
  %v11750 = vpop.permute.xlu0 %11749
  %11751 = vrot.lane.b32.xlu0 %v9502, 64
  %v11752 = vpop.permute.xlu0 %11751
  %11753 = vrot.lane.b32.xlu0 %v11407, 64
  %v11754 = vpop.permute.xlu0 %11753
  %11755 = vrot.lane.b32.xlu0 %v9504, 64
  %v11756 = vpop.permute.xlu0 %11755
  %11757 = vrot.lane.b32.xlu0 %v11408, 64
  %v11758 = vpop.permute.xlu0 %11757
  %11759 = vrot.lane.b32.xlu0 %v9506, 64
  %v11760 = vpop.permute.xlu0 %11759
  %11761 = vrot.lane.b32.xlu0 %v11409, 64
  %v11762 = vpop.permute.xlu0 %11761
  %11763 = vrot.lane.b32.xlu0 %v9508, 64
  %v11764 = vpop.permute.xlu0 %11763
  %11765 = vrot.lane.b32.xlu0 %v11410, 64
  %v11766 = vpop.permute.xlu0 %11765
  %11767 = vrot.lane.b32.xlu0 %v9510, 64
  %v11768 = vpop.permute.xlu0 %11767
  %11769 = vrot.lane.b32.xlu0 %v11412, 64
  %v11770 = vpop.permute.xlu0 %11769
  %11771 = vrot.lane.b32.xlu0 %v11556, 64
  %v11772 = vpop.permute.xlu0 %11771
  %11773 = vrot.lane.b32.xlu0 %v11413, 64
  %v11774 = vpop.permute.xlu0 %11773
  %11775 = vrot.lane.b32.xlu0 %v9514, 64
  %v11776 = vpop.permute.xlu0 %11775
  %11777 = vrot.lane.b32.xlu0 %v11414, 64
  %v11778 = vpop.permute.xlu0 %11777
  %11779 = vrot.lane.b32.xlu0 %v9516, 64
  %v11780 = vpop.permute.xlu0 %11779
  %11781 = vrot.lane.b32.xlu0 %v11415, 64
  %v11782 = vpop.permute.xlu0 %11781
  %11783 = vrot.lane.b32.xlu0 %v9518, 64
  %v11784 = vpop.permute.xlu0 %11783
  %11785 = vrot.lane.b32.xlu0 %v11416, 64
  %v11786 = vpop.permute.xlu0 %11785
  %11787 = vrot.lane.b32.xlu0 %v9520, 64
  %v11788 = vpop.permute.xlu0 %11787
  %11789 = vrot.lane.b32.xlu0 %v11417, 64
  %v11790 = vpop.permute.xlu0 %11789
  %11791 = vrot.lane.b32.xlu0 %v9522, 64
  %v11792 = vpop.permute.xlu0 %11791
  %11793 = vrot.lane.b32.xlu0 %v11418, 64
  %v11794 = vpop.permute.xlu0 %11793
  %11795 = vrot.lane.b32.xlu0 %v9524, 64
  %v11796 = vpop.permute.xlu0 %11795
  %11797 = vrot.lane.b32.xlu0 %v11419, 64
  %v11798 = vpop.permute.xlu0 %11797
  %11799 = vrot.lane.b32.xlu0 %v9526, 64
  %v11800 = vpop.permute.xlu0 %11799
  %11801 = vrot.lane.b32.xlu0 %v11421, 64
  %v11802 = vpop.permute.xlu0 %11801
  %11803 = vrot.lane.b32.xlu0 %v11558, 64
  %v11804 = vpop.permute.xlu0 %11803
  %11805 = vrot.lane.b32.xlu0 %v11422, 64
  %v11806 = vpop.permute.xlu0 %11805
  %11807 = vrot.lane.b32.xlu0 %v9530, 64
  %v11808 = vpop.permute.xlu0 %11807
  %11809 = vrot.lane.b32.xlu0 %v11423, 64
  %v11810 = vpop.permute.xlu0 %11809
  %11811 = vrot.lane.b32.xlu0 %v9532, 64
  %v11812 = vpop.permute.xlu0 %11811
  %11813 = vrot.lane.b32.xlu0 %v11424, 64
  %v11814 = vpop.permute.xlu0 %11813
  %11815 = vrot.lane.b32.xlu0 %v9534, 64
  %v11816 = vpop.permute.xlu0 %11815
  %11817 = vrot.lane.b32.xlu0 %v11425, 64
  %v11818 = vpop.permute.xlu0 %11817
  %11819 = vrot.lane.b32.xlu0 %v9536, 64
  %v11820 = vpop.permute.xlu0 %11819
  %11821 = vrot.lane.b32.xlu0 %v11426, 64
  %v11822 = vpop.permute.xlu0 %11821
  %11823 = vrot.lane.b32.xlu0 %v9538, 64
  %v11824 = vpop.permute.xlu0 %11823
  %11825 = vrot.lane.b32.xlu0 %v11427, 64
  %v11826 = vpop.permute.xlu0 %11825
  %11827 = vrot.lane.b32.xlu0 %v9540, 64
  %v11828 = vpop.permute.xlu0 %11827
  %11829 = vrot.lane.b32.xlu0 %v11428, 64
  %v11830 = vpop.permute.xlu0 %11829
  %11831 = vrot.lane.b32.xlu0 %v9542, 64
  %v11832 = vpop.permute.xlu0 %11831
  %11833 = vrot.lane.b32.xlu0 %v11430, 64
  %v11834 = vpop.permute.xlu0 %11833
  %11835 = vrot.lane.b32.xlu0 %v11560, 64
  %v11836 = vpop.permute.xlu0 %11835
  %11837 = vrot.lane.b32.xlu0 %v11431, 64
  %v11838 = vpop.permute.xlu0 %11837
  %11839 = vrot.lane.b32.xlu0 %v9546, 64
  %v11840 = vpop.permute.xlu0 %11839
  %11841 = vrot.lane.b32.xlu0 %v11432, 64
  %v11842 = vpop.permute.xlu0 %11841
  %11843 = vrot.lane.b32.xlu0 %v9548, 64
  %v11844 = vpop.permute.xlu0 %11843
  %11845 = vrot.lane.b32.xlu0 %v11433, 64
  %v11846 = vpop.permute.xlu0 %11845
  %11847 = vrot.lane.b32.xlu0 %v9550, 64
  %v11848 = vpop.permute.xlu0 %11847
  %11849 = vrot.lane.b32.xlu0 %v11434, 64
  %v11850 = vpop.permute.xlu0 %11849
  %11851 = vrot.lane.b32.xlu0 %v9552, 64
  %v11852 = vpop.permute.xlu0 %11851
  %11853 = vrot.lane.b32.xlu0 %v11435, 64
  %v11854 = vpop.permute.xlu0 %11853
  %11855 = vrot.lane.b32.xlu0 %v9554, 64
  %v11856 = vpop.permute.xlu0 %11855
  %11857 = vrot.lane.b32.xlu0 %v11436, 64
  %v11858 = vpop.permute.xlu0 %11857
  %11859 = vrot.lane.b32.xlu0 %v9556, 64
  %v11860 = vpop.permute.xlu0 %11859
  %11861 = vrot.lane.b32.xlu0 %v11437, 64
  %v11862 = vpop.permute.xlu0 %11861
  %11863 = vrot.lane.b32.xlu0 %v9558, 64
  %v11864 = vpop.permute.xlu0 %11863
  %11865 = vrot.lane.b32.xlu0 %v11439, 64
  %v11866 = vpop.permute.xlu0 %11865
  %11867 = vrot.lane.b32.xlu0 %v11562, 64
  %v11868 = vpop.permute.xlu0 %11867
  %11869 = vrot.lane.b32.xlu0 %v11440, 64
  %v11870 = vpop.permute.xlu0 %11869
  %11871 = vrot.lane.b32.xlu0 %v9562, 64
  %v11872 = vpop.permute.xlu0 %11871
  %11873 = vrot.lane.b32.xlu0 %v11441, 64
  %v11874 = vpop.permute.xlu0 %11873
  %11875 = vrot.lane.b32.xlu0 %v9564, 64
  %v11876 = vpop.permute.xlu0 %11875
  %11877 = vrot.lane.b32.xlu0 %v11442, 64
  %v11878 = vpop.permute.xlu0 %11877
  %11879 = vrot.lane.b32.xlu0 %v9566, 64
  %v11880 = vpop.permute.xlu0 %11879
  %11881 = vrot.lane.b32.xlu0 %v11443, 64
  %v11882 = vpop.permute.xlu0 %11881
  %11883 = vrot.lane.b32.xlu0 %v9568, 64
  %v11884 = vpop.permute.xlu0 %11883
  %11885 = vrot.lane.b32.xlu0 %v11444, 64
  %v11886 = vpop.permute.xlu0 %11885
  %11887 = vrot.lane.b32.xlu0 %v9570, 64
  %v11888 = vpop.permute.xlu0 %11887
  %11889 = vrot.lane.b32.xlu0 %v11445, 64
  %v11890 = vpop.permute.xlu0 %11889
  %11891 = vrot.lane.b32.xlu0 %v9572, 64
  %v11892 = vpop.permute.xlu0 %11891
  %11893 = vrot.lane.b32.xlu0 %v11446, 64
  %v11894 = vpop.permute.xlu0 %11893
  %11895 = vrot.lane.b32.xlu0 %v9574, 64
  %v11896 = vpop.permute.xlu0 %11895
  %11897 = vrot.lane.b32.xlu0 %v11448, 64
  %v11898 = vpop.permute.xlu0 %11897
  %11899 = vrot.lane.b32.xlu0 %v11564, 64
  %v11900 = vpop.permute.xlu0 %11899
  %11901 = vrot.lane.b32.xlu0 %v11450, 64
  %v11902 = vpop.permute.xlu0 %11901
  %11903 = vrot.lane.b32.xlu0 %v11566, 64
  %v11904 = vpop.permute.xlu0 %11903
  %11905 = vrot.lane.b32.xlu0 %v11452, 64
  %v11906 = vpop.permute.xlu0 %11905
  %11907 = vrot.lane.b32.xlu0 %v11568, 64
  %v11908 = vpop.permute.xlu0 %11907
  %11909 = vrot.lane.b32.xlu0 %v11454, 64
  %v11910 = vpop.permute.xlu0 %11909
  %11911 = vrot.lane.b32.xlu0 %v11570, 64
  %v11912 = vpop.permute.xlu0 %11911
  %11913 = vrot.lane.b32.xlu0 %v11456, 64
  %v11914 = vpop.permute.xlu0 %11913
  %11915 = vrot.lane.b32.xlu0 %v11572, 64
  %v11916 = vpop.permute.xlu0 %11915
  %11917 = vrot.lane.b32.xlu0 %v11458, 64
  %v11918 = vpop.permute.xlu0 %11917
  %11919 = vrot.lane.b32.xlu0 %v11574, 64
  %v11920 = vpop.permute.xlu0 %11919
  %11921 = vrot.lane.b32.xlu0 %v11460, 64
  %v11922 = vpop.permute.xlu0 %11921
  %11923 = vrot.lane.b32.xlu0 %v11576, 64
  %v11924 = vpop.permute.xlu0 %11923
  %11925 = vrot.lane.b32.xlu0 %v11462, 64
  %v11926 = vpop.permute.xlu0 %11925
  %11927 = vrot.lane.b32.xlu0 %v11578, 64
  %v11928 = vpop.permute.xlu0 %11927
  %11929 = vrot.lane.b32.xlu0 %v11464, 64
  %v11930 = vpop.permute.xlu0 %11929
  %11931 = vrot.lane.b32.xlu0 %v11580, 64
  %v11932 = vpop.permute.xlu0 %11931
  %11933 = vrot.lane.b32.xlu0 %v11466, 64
  %v11934 = vpop.permute.xlu0 %11933
  %11935 = vrot.lane.b32.xlu0 %v11582, 64
  %v11936 = vpop.permute.xlu0 %11935
  %11937 = vrot.lane.b32.xlu0 %v11468, 64
  %v11938 = vpop.permute.xlu0 %11937
  %11939 = vrot.lane.b32.xlu0 %v11584, 64
  %v11940 = vpop.permute.xlu0 %11939
  %11941 = vrot.lane.b32.xlu0 %v11470, 64
  %v11942 = vpop.permute.xlu0 %11941
  %11943 = vrot.lane.b32.xlu0 %v11586, 64
  %v11944 = vpop.permute.xlu0 %11943
  %11945 = vrot.lane.b32.xlu0 %v11472, 64
  %v11946 = vpop.permute.xlu0 %11945
  %11947 = vrot.lane.b32.xlu0 %v11588, 64
  %v11948 = vpop.permute.xlu0 %11947
  %11949 = vrot.lane.b32.xlu0 %v11474, 64
  %v11950 = vpop.permute.xlu0 %11949
  %11951 = vrot.lane.b32.xlu0 %v11590, 64
  %v11952 = vpop.permute.xlu0 %11951
  %11953 = vrot.lane.b32.xlu0 %v11476, 64
  %v11954 = vpop.permute.xlu0 %11953
  %11955 = vrot.lane.b32.xlu0 %v11592, 64
  %v11956 = vpop.permute.xlu0 %11955
  %11957 = vrot.lane.b32.xlu0 %v11478, 64
  %v11958 = vpop.permute.xlu0 %11957
  %11959 = vrot.lane.b32.xlu0 %v11594, 64
  %v11960 = vpop.permute.xlu0 %11959
  %11961 = vrot.lane.b32.xlu0 %v11480, 64
  %v11962 = vpop.permute.xlu0 %11961
  %11963 = vrot.lane.b32.xlu0 %v11596, 64
  %v11964 = vpop.permute.xlu0 %11963
  %11965 = vrot.lane.b32.xlu0 %v11482, 64
  %v11966 = vpop.permute.xlu0 %11965
  %11967 = vrot.lane.b32.xlu0 %v11598, 64
  %v11968 = vpop.permute.xlu0 %11967
  %11969 = vrot.lane.b32.xlu0 %v11484, 64
  %v11970 = vpop.permute.xlu0 %11969
  %11971 = vrot.lane.b32.xlu0 %v11600, 64
  %v11972 = vpop.permute.xlu0 %11971
  %11973 = vrot.lane.b32.xlu0 %v11486, 64
  %v11974 = vpop.permute.xlu0 %11973
  %11975 = vrot.lane.b32.xlu0 %v11602, 64
  %v11976 = vpop.permute.xlu0 %11975
  %11977 = vrot.lane.b32.xlu0 %v11488, 64
  %v11978 = vpop.permute.xlu0 %11977
  %11979 = vrot.lane.b32.xlu0 %v11604, 64
  %v11980 = vpop.permute.xlu0 %11979
  %11981 = vrot.lane.b32.xlu0 %v11490, 64
  %v11982 = vpop.permute.xlu0 %11981
  %11983 = vrot.lane.b32.xlu0 %v11606, 64
  %v11984 = vpop.permute.xlu0 %11983
  %11985 = vrot.lane.b32.xlu0 %v11492, 64
  %v11986 = vpop.permute.xlu0 %11985
  %11987 = vrot.lane.b32.xlu0 %v11608, 64
  %v11988 = vpop.permute.xlu0 %11987
  %11989 = vrot.lane.b32.xlu0 %v11494, 64
  %v11990 = vpop.permute.xlu0 %11989
  %11991 = vrot.lane.b32.xlu0 %v11610, 64
  %v11992 = vpop.permute.xlu0 %11991
  %11993 = vrot.lane.b32.xlu0 %v11496, 64
  %v11994 = vpop.permute.xlu0 %11993
  %11995 = vrot.lane.b32.xlu0 %v11612, 64
  %v11996 = vpop.permute.xlu0 %11995
  %vm11997 = vcmask 523264
  %v11998 = vsel %vm11997, %v11742, %v11744
  %v11999 = vsel %vm11997, %v11746, %v11748
  %v12000 = vsel %vm11997, %v11750, %v11752
  %v12001 = vsel %vm11997, %v11754, %v11756
  %v12002 = vsel %vm11997, %v11758, %v11760
  %v12003 = vsel %vm11997, %v11762, %v11764
  %v12004 = vsel %vm11997, %v11766, %v11768
  %v12005 = vsel %vm11997, %v11770, %v11772
  %v12006 = vsel %vm11997, %v11774, %v11776
  %v12007 = vsel %vm11997, %v11778, %v11780
  %v12008 = vsel %vm11997, %v11782, %v11784
  %v12009 = vsel %vm11997, %v11786, %v11788
  %v12010 = vsel %vm11997, %v11790, %v11792
  %v12011 = vsel %vm11997, %v11794, %v11796
  %v12012 = vsel %vm11997, %v11798, %v11800
  %v12013 = vsel %vm11997, %v11802, %v11804
  %v12014 = vsel %vm11997, %v11806, %v11808
  %v12015 = vsel %vm11997, %v11810, %v11812
  %v12016 = vsel %vm11997, %v11814, %v11816
  %v12017 = vsel %vm11997, %v11818, %v11820
  %v12018 = vsel %vm11997, %v11822, %v11824
  %v12019 = vsel %vm11997, %v11826, %v11828
  %v12020 = vsel %vm11997, %v11830, %v11832
  %v12021 = vsel %vm11997, %v11834, %v11836
  %v12022 = vsel %vm11997, %v11838, %v11840
  %v12023 = vsel %vm11997, %v11842, %v11844
  %v12024 = vsel %vm11997, %v11846, %v11848
  %v12025 = vsel %vm11997, %v11850, %v11852
  %v12026 = vsel %vm11997, %v11854, %v11856
  %v12027 = vsel %vm11997, %v11858, %v11860
  %v12028 = vsel %vm11997, %v11862, %v11864
  %v12029 = vsel %vm11997, %v11866, %v11868
  %v12030 = vsel %vm11997, %v11870, %v11872
  %v12031 = vsel %vm11997, %v11874, %v11876
  %v12032 = vsel %vm11997, %v11878, %v11880
  %v12033 = vsel %vm11997, %v11882, %v11884
  %v12034 = vsel %vm11997, %v11886, %v11888
  %v12035 = vsel %vm11997, %v11890, %v11892
  %v12036 = vsel %vm11997, %v11894, %v11896
  %v12037 = vsel %vm11997, %v11898, %v11900
  %v12038 = vsel %vm11997, %v11902, %v11904
  %v12039 = vsel %vm11997, %v11906, %v11908
  %v12040 = vsel %vm11997, %v11910, %v11912
  %v12041 = vsel %vm11997, %v11914, %v11916
  %v12042 = vsel %vm11997, %v11918, %v11920
  %v12043 = vsel %vm11997, %v11922, %v11924
  %v12044 = vsel %vm11997, %v11926, %v11928
  %v12045 = vsel %vm11997, %v11930, %v11932
  %v12046 = vsel %vm11997, %v11934, %v11936
  %v12047 = vsel %vm11997, %v11938, %v11940
  %v12048 = vsel %vm11997, %v11942, %v11944
  %v12049 = vsel %vm11997, %v11946, %v11948
  %v12050 = vsel %vm11997, %v11950, %v11952
  %v12051 = vsel %vm11997, %v11954, %v11956
  %v12052 = vsel %vm11997, %v11958, %v11960
  %v12053 = vsel %vm11997, %v11962, %v11964
  %v12054 = vsel %vm11997, %v11966, %v11968
  %v12055 = vsel %vm11997, %v11970, %v11972
  %v12056 = vsel %vm11997, %v11974, %v11976
  %v12057 = vsel %vm11997, %v11978, %v11980
  %v12058 = vsel %vm11997, %v11982, %v11984
  %v12059 = vsel %vm11997, %v11986, %v11988
  %v12060 = vsel %vm11997, %v11990, %v11992
  %v12061 = vsel %vm11997, %v11994, %v11996
  %vm12062 = vcmask 523264
  %v12064 = vsel %vm12062, %v10351, %v11742
  %v12066 = vsel %vm12062, %v10353, %v11746
  %v12068 = vsel %vm12062, %v10355, %v11750
  %v12070 = vsel %vm12062, %v10357, %v11754
  %v12072 = vsel %vm12062, %v10359, %v11758
  %v12074 = vsel %vm12062, %v10361, %v11762
  %v12076 = vsel %vm12062, %v10363, %v11766
  %v12078 = vsel %vm12062, %v10365, %v11770
  %v12080 = vsel %vm12062, %v10367, %v11774
  %v12082 = vsel %vm12062, %v10369, %v11778
  %v12084 = vsel %vm12062, %v10371, %v11782
  %v12086 = vsel %vm12062, %v10373, %v11786
  %v12088 = vsel %vm12062, %v10375, %v11790
  %v12090 = vsel %vm12062, %v10377, %v11794
  %v12092 = vsel %vm12062, %v10379, %v11798
  %v12094 = vsel %vm12062, %v10381, %v11802
  %v12096 = vsel %vm12062, %v10383, %v11806
  %v12098 = vsel %vm12062, %v10385, %v11810
  %v12100 = vsel %vm12062, %v10387, %v11814
  %v12102 = vsel %vm12062, %v10389, %v11818
  %v12104 = vsel %vm12062, %v10391, %v11822
  %v12106 = vsel %vm12062, %v10393, %v11826
  %v12108 = vsel %vm12062, %v10395, %v11830
  %v12110 = vsel %vm12062, %v10397, %v11834
  %v12112 = vsel %vm12062, %v10399, %v11838
  %v12114 = vsel %vm12062, %v10401, %v11842
  %v12116 = vsel %vm12062, %v10403, %v11846
  %v12118 = vsel %vm12062, %v10405, %v11850
  %v12120 = vsel %vm12062, %v10407, %v11854
  %v12122 = vsel %vm12062, %v10409, %v11858
  %v12124 = vsel %vm12062, %v10411, %v11862
  %v12126 = vsel %vm12062, %v10413, %v11866
  %v12128 = vsel %vm12062, %v10415, %v11870
  %v12130 = vsel %vm12062, %v10417, %v11874
  %v12132 = vsel %vm12062, %v10419, %v11878
  %v12134 = vsel %vm12062, %v10421, %v11882
  %v12136 = vsel %vm12062, %v10423, %v11886
  %v12138 = vsel %vm12062, %v10425, %v11890
  %v12140 = vsel %vm12062, %v10427, %v11894
  %v12142 = vsel %vm12062, %v10429, %v11898
  %v12144 = vsel %vm12062, %v10431, %v11902
  %v12146 = vsel %vm12062, %v10433, %v11906
  %v12148 = vsel %vm12062, %v10435, %v11910
  %v12150 = vsel %vm12062, %v10437, %v11914
  %v12152 = vsel %vm12062, %v10439, %v11918
  %v12154 = vsel %vm12062, %v10441, %v11922
  %v12156 = vsel %vm12062, %v10443, %v11926
  %v12158 = vsel %vm12062, %v10445, %v11930
  %v12160 = vsel %vm12062, %v10447, %v11934
  %v12162 = vsel %vm12062, %v10449, %v11938
  %v12164 = vsel %vm12062, %v10451, %v11942
  %v12166 = vsel %vm12062, %v10453, %v11946
  %v12168 = vsel %vm12062, %v10455, %v11950
  %v12170 = vsel %vm12062, %v10457, %v11954
  %v12172 = vsel %vm12062, %v10459, %v11958
  %v12174 = vsel %vm12062, %v10461, %v11962
  %v12176 = vsel %vm12062, %v10463, %v11966
  %v12178 = vsel %vm12062, %v10465, %v11970
  %v12180 = vsel %vm12062, %v10467, %v11974
  %v12182 = vsel %vm12062, %v10469, %v11978
  %v12184 = vsel %vm12062, %v10471, %v11982
  %v12186 = vsel %vm12062, %v10473, %v11986
  %v12188 = vsel %vm12062, %v10475, %v11990
  %v12190 = vsel %vm12062, %v10477, %v11994
  %v12383 = vunpack.c.l.b16 %v9190
  %v12384 = vunpack.c.l.b16 %v9964
  %v12385 = vunpack.c.l.b16 %v12064
  %v12386 = vunpack.c.l.b16 %v11998
  %v12387 = vunpack.c.l.b16 %v9192
  %v12388 = vunpack.c.l.b16 %v9966
  %v12389 = vunpack.c.l.b16 %v12066
  %v12390 = vunpack.c.l.b16 %v11999
  %v12391 = vunpack.c.l.b16 %v9194
  %v12392 = vunpack.c.l.b16 %v9968
  %v12393 = vunpack.c.l.b16 %v12068
  %v12394 = vunpack.c.l.b16 %v12000
  %v12395 = vunpack.c.l.b16 %v9196
  %v12396 = vunpack.c.l.b16 %v9970
  %v12397 = vunpack.c.l.b16 %v12070
  %v12398 = vunpack.c.l.b16 %v12001
  %v12399 = vunpack.c.l.b16 %v9198
  %v12400 = vunpack.c.l.b16 %v9972
  %v12401 = vunpack.c.l.b16 %v12072
  %v12402 = vunpack.c.l.b16 %v12002
  %v12403 = vunpack.c.l.b16 %v9200
  %v12404 = vunpack.c.l.b16 %v9974
  %v12405 = vunpack.c.l.b16 %v12074
  %v12406 = vunpack.c.l.b16 %v12003
  %v12407 = vunpack.c.l.b16 %v9202
  %v12408 = vunpack.c.l.b16 %v9976
  %v12409 = vunpack.c.l.b16 %v12076
  %v12410 = vunpack.c.l.b16 %v12004
  %v12411 = vunpack.c.l.b16 %v9204
  %v12412 = vunpack.c.l.b16 %v9978
  %v12413 = vunpack.c.l.b16 %v12078
  %v12414 = vunpack.c.l.b16 %v12005
  %v12415 = vunpack.c.l.b16 %v9206
  %v12416 = vunpack.c.l.b16 %v9980
  %v12417 = vunpack.c.l.b16 %v12080
  %v12418 = vunpack.c.l.b16 %v12006
  %v12419 = vunpack.c.l.b16 %v9208
  %v12420 = vunpack.c.l.b16 %v9982
  %v12421 = vunpack.c.l.b16 %v12082
  %v12422 = vunpack.c.l.b16 %v12007
  %v12423 = vunpack.c.l.b16 %v9210
  %v12424 = vunpack.c.l.b16 %v9984
  %v12425 = vunpack.c.l.b16 %v12084
  %v12426 = vunpack.c.l.b16 %v12008
  %v12427 = vunpack.c.l.b16 %v9212
  %v12428 = vunpack.c.l.b16 %v9986
  %v12429 = vunpack.c.l.b16 %v12086
  %v12430 = vunpack.c.l.b16 %v12009
  %v12431 = vunpack.c.l.b16 %v9214
  %v12432 = vunpack.c.l.b16 %v9988
  %v12433 = vunpack.c.l.b16 %v12088
  %v12434 = vunpack.c.l.b16 %v12010
  %v12435 = vunpack.c.l.b16 %v9216
  %v12436 = vunpack.c.l.b16 %v9990
  %v12437 = vunpack.c.l.b16 %v12090
  %v12438 = vunpack.c.l.b16 %v12011
  %v12439 = vunpack.c.l.b16 %v9218
  %v12440 = vunpack.c.l.b16 %v9992
  %v12441 = vunpack.c.l.b16 %v12092
  %v12442 = vunpack.c.l.b16 %v12012
  %v12443 = vunpack.c.l.b16 %v9220
  %v12444 = vunpack.c.l.b16 %v9994
  %v12445 = vunpack.c.l.b16 %v12094
  %v12446 = vunpack.c.l.b16 %v12013
  %v12447 = vunpack.c.l.b16 %v9222
  %v12448 = vunpack.c.l.b16 %v9996
  %v12449 = vunpack.c.l.b16 %v12096
  %v12450 = vunpack.c.l.b16 %v12014
  %v12451 = vunpack.c.l.b16 %v9224
  %v12452 = vunpack.c.l.b16 %v9998
  %v12453 = vunpack.c.l.b16 %v12098
  %v12454 = vunpack.c.l.b16 %v12015
  %v12455 = vunpack.c.l.b16 %v9226
  %v12456 = vunpack.c.l.b16 %v10000
  %v12457 = vunpack.c.l.b16 %v12100
  %v12458 = vunpack.c.l.b16 %v12016
  %v12459 = vunpack.c.l.b16 %v9228
  %v12460 = vunpack.c.l.b16 %v10002
  %v12461 = vunpack.c.l.b16 %v12102
  %v12462 = vunpack.c.l.b16 %v12017
  %v12463 = vunpack.c.l.b16 %v9230
  %v12464 = vunpack.c.l.b16 %v10004
  %v12465 = vunpack.c.l.b16 %v12104
  %v12466 = vunpack.c.l.b16 %v12018
  %v12467 = vunpack.c.l.b16 %v9232
  %v12468 = vunpack.c.l.b16 %v10006
  %v12469 = vunpack.c.l.b16 %v12106
  %v12470 = vunpack.c.l.b16 %v12019
  %v12471 = vunpack.c.l.b16 %v9234
  %v12472 = vunpack.c.l.b16 %v10008
  %v12473 = vunpack.c.l.b16 %v12108
  %v12474 = vunpack.c.l.b16 %v12020
  %v12475 = vunpack.c.l.b16 %v9236
  %v12476 = vunpack.c.l.b16 %v10010
  %v12477 = vunpack.c.l.b16 %v12110
  %v12478 = vunpack.c.l.b16 %v12021
  %v12479 = vunpack.c.l.b16 %v9238
  %v12480 = vunpack.c.l.b16 %v10012
  %v12481 = vunpack.c.l.b16 %v12112
  %v12482 = vunpack.c.l.b16 %v12022
  %v12483 = vunpack.c.l.b16 %v9240
  %v12484 = vunpack.c.l.b16 %v10014
  %v12485 = vunpack.c.l.b16 %v12114
  %v12486 = vunpack.c.l.b16 %v12023
  %v12487 = vunpack.c.l.b16 %v9242
  %v12488 = vunpack.c.l.b16 %v10016
  %v12489 = vunpack.c.l.b16 %v12116
  %v12490 = vunpack.c.l.b16 %v12024
  %v12491 = vunpack.c.l.b16 %v9244
  %v12492 = vunpack.c.l.b16 %v10018
  %v12493 = vunpack.c.l.b16 %v12118
  %v12494 = vunpack.c.l.b16 %v12025
  %v12495 = vunpack.c.l.b16 %v9246
  %v12496 = vunpack.c.l.b16 %v10020
  %v12497 = vunpack.c.l.b16 %v12120
  %v12498 = vunpack.c.l.b16 %v12026
  %v12499 = vunpack.c.l.b16 %v9248
  %v12500 = vunpack.c.l.b16 %v10022
  %v12501 = vunpack.c.l.b16 %v12122
  %v12502 = vunpack.c.l.b16 %v12027
  %v12503 = vunpack.c.l.b16 %v9250
  %v12504 = vunpack.c.l.b16 %v10024
  %v12505 = vunpack.c.l.b16 %v12124
  %v12506 = vunpack.c.l.b16 %v12028
  %v12507 = vunpack.c.l.b16 %v9252
  %v12508 = vunpack.c.l.b16 %v10026
  %v12509 = vunpack.c.l.b16 %v12126
  %v12510 = vunpack.c.l.b16 %v12029
  %v12511 = vunpack.c.l.b16 %v9254
  %v12512 = vunpack.c.l.b16 %v10028
  %v12513 = vunpack.c.l.b16 %v12128
  %v12514 = vunpack.c.l.b16 %v12030
  %v12515 = vunpack.c.l.b16 %v9256
  %v12516 = vunpack.c.l.b16 %v10030
  %v12517 = vunpack.c.l.b16 %v12130
  %v12518 = vunpack.c.l.b16 %v12031
  %v12519 = vunpack.c.l.b16 %v9258
  %v12520 = vunpack.c.l.b16 %v10032
  %v12521 = vunpack.c.l.b16 %v12132
  %v12522 = vunpack.c.l.b16 %v12032
  %v12523 = vunpack.c.l.b16 %v9260
  %v12524 = vunpack.c.l.b16 %v10034
  %v12525 = vunpack.c.l.b16 %v12134
  %v12526 = vunpack.c.l.b16 %v12033
  %v12527 = vunpack.c.l.b16 %v9262
  %v12528 = vunpack.c.l.b16 %v10036
  %v12529 = vunpack.c.l.b16 %v12136
  %v12530 = vunpack.c.l.b16 %v12034
  %v12531 = vunpack.c.l.b16 %v9264
  %v12532 = vunpack.c.l.b16 %v10038
  %v12533 = vunpack.c.l.b16 %v12138
  %v12534 = vunpack.c.l.b16 %v12035
  %v12535 = vunpack.c.l.b16 %v9266
  %v12536 = vunpack.c.l.b16 %v10040
  %v12537 = vunpack.c.l.b16 %v12140
  %v12538 = vunpack.c.l.b16 %v12036
  %v12539 = vunpack.c.l.b16 %v9268
  %v12540 = vunpack.c.l.b16 %v10042
  %v12541 = vunpack.c.l.b16 %v12142
  %v12542 = vunpack.c.l.b16 %v12037
  %v12543 = vunpack.c.l.b16 %v9270
  %v12544 = vunpack.c.l.b16 %v10044
  %v12545 = vunpack.c.l.b16 %v12144
  %v12546 = vunpack.c.l.b16 %v12038
  %v12547 = vunpack.c.l.b16 %v9272
  %v12548 = vunpack.c.l.b16 %v10046
  %v12549 = vunpack.c.l.b16 %v12146
  %v12550 = vunpack.c.l.b16 %v12039
  %v12551 = vunpack.c.l.b16 %v9274
  %v12552 = vunpack.c.l.b16 %v10048
  %v12553 = vunpack.c.l.b16 %v12148
  %v12554 = vunpack.c.l.b16 %v12040
  %v12555 = vunpack.c.l.b16 %v9276
  %v12556 = vunpack.c.l.b16 %v10050
  %v12557 = vunpack.c.l.b16 %v12150
  %v12558 = vunpack.c.l.b16 %v12041
  %v12559 = vunpack.c.l.b16 %v9278
  %v12560 = vunpack.c.l.b16 %v10052
  %v12561 = vunpack.c.l.b16 %v12152
  %v12562 = vunpack.c.l.b16 %v12042
  %v12563 = vunpack.c.l.b16 %v9280
  %v12564 = vunpack.c.l.b16 %v10054
  %v12565 = vunpack.c.l.b16 %v12154
  %v12566 = vunpack.c.l.b16 %v12043
  %v12567 = vunpack.c.l.b16 %v9282
  %v12568 = vunpack.c.l.b16 %v10056
  %v12569 = vunpack.c.l.b16 %v12156
  %v12570 = vunpack.c.l.b16 %v12044
  %v12571 = vunpack.c.l.b16 %v9284
  %v12572 = vunpack.c.l.b16 %v10058
  %v12573 = vunpack.c.l.b16 %v12158
  %v12574 = vunpack.c.l.b16 %v12045
  %v12575 = vunpack.c.l.b16 %v9286
  %v12576 = vunpack.c.l.b16 %v10060
  %v12577 = vunpack.c.l.b16 %v12160
  %v12578 = vunpack.c.l.b16 %v12046
  %v12579 = vunpack.c.l.b16 %v9288
  %v12580 = vunpack.c.l.b16 %v10062
  %v12581 = vunpack.c.l.b16 %v12162
  %v12582 = vunpack.c.l.b16 %v12047
  %v12583 = vunpack.c.l.b16 %v9290
  %v12584 = vunpack.c.l.b16 %v10064
  %v12585 = vunpack.c.l.b16 %v12164
  %v12586 = vunpack.c.l.b16 %v12048
  %v12587 = vunpack.c.l.b16 %v9292
  %v12588 = vunpack.c.l.b16 %v10066
  %v12589 = vunpack.c.l.b16 %v12166
  %v12590 = vunpack.c.l.b16 %v12049
  %v12591 = vunpack.c.l.b16 %v9294
  %v12592 = vunpack.c.l.b16 %v10068
  %v12593 = vunpack.c.l.b16 %v12168
  %v12594 = vunpack.c.l.b16 %v12050
  %v12595 = vunpack.c.l.b16 %v9296
  %v12596 = vunpack.c.l.b16 %v10070
  %v12597 = vunpack.c.l.b16 %v12170
  %v12598 = vunpack.c.l.b16 %v12051
  %v12599 = vunpack.c.l.b16 %v9298
  %v12600 = vunpack.c.l.b16 %v10072
  %v12601 = vunpack.c.l.b16 %v12172
  %v12602 = vunpack.c.l.b16 %v12052
  %v12603 = vunpack.c.l.b16 %v9300
  %v12604 = vunpack.c.l.b16 %v10074
  %v12605 = vunpack.c.l.b16 %v12174
  %v12606 = vunpack.c.l.b16 %v12053
  %v12607 = vunpack.c.l.b16 %v9302
  %v12608 = vunpack.c.l.b16 %v10076
  %v12609 = vunpack.c.l.b16 %v12176
  %v12610 = vunpack.c.l.b16 %v12054
  %v12611 = vunpack.c.l.b16 %v9304
  %v12612 = vunpack.c.l.b16 %v10078
  %v12613 = vunpack.c.l.b16 %v12178
  %v12614 = vunpack.c.l.b16 %v12055
  %v12615 = vunpack.c.l.b16 %v9306
  %v12616 = vunpack.c.l.b16 %v10080
  %v12617 = vunpack.c.l.b16 %v12180
  %v12618 = vunpack.c.l.b16 %v12056
  %v12619 = vunpack.c.l.b16 %v9308
  %v12620 = vunpack.c.l.b16 %v10082
  %v12621 = vunpack.c.l.b16 %v12182
  %v12622 = vunpack.c.l.b16 %v12057
  %v12623 = vunpack.c.l.b16 %v9310
  %v12624 = vunpack.c.l.b16 %v10084
  %v12625 = vunpack.c.l.b16 %v12184
  %v12626 = vunpack.c.l.b16 %v12058
  %v12627 = vunpack.c.l.b16 %v9312
  %v12628 = vunpack.c.l.b16 %v10086
  %v12629 = vunpack.c.l.b16 %v12186
  %v12630 = vunpack.c.l.b16 %v12059
  %v12631 = vunpack.c.l.b16 %v9314
  %v12632 = vunpack.c.l.b16 %v10088
  %v12633 = vunpack.c.l.b16 %v12188
  %v12634 = vunpack.c.l.b16 %v12060
  %v12635 = vunpack.c.l.b16 %v9316
  %v12636 = vunpack.c.l.b16 %v10090
  %v12637 = vunpack.c.l.b16 %v12190
  %v12638 = vunpack.c.l.b16 %v12061
  %v12639 = vld [vmem:[%s3] sm:$0xf]
  %v12640 = vld [vmem:[%s3 + $0x4] sm:$0xf]
  %v12641 = vld [vmem:[%s3 + $0x8] sm:$0xf]
  %v12642 = vld [vmem:[%s3 + $0xc] sm:$0xf]
  %v12643 = vld [vmem:[%s3 + $0x10] sm:$0xf]
  %v12644 = vld [vmem:[%s3 + $0x14] sm:$0xf]
  %v12645 = vld [vmem:[%s3 + $0x18] sm:$0xf]
  %v12646 = vld [vmem:[%s3 + $0x1c] sm:$0xf]
  %v12647 = vld [vmem:[%s3 + $0x20] sm:$0xf]
  %v12648 = vld [vmem:[%s3 + $0x24] sm:$0xf]
  %v12649 = vld [vmem:[%s3 + $0x28] sm:$0xf]
  %v12650 = vld [vmem:[%s3 + $0x2c] sm:$0xf]
  %v12651 = vld [vmem:[%s3 + $0x30] sm:$0xf]
  %v12652 = vld [vmem:[%s3 + $0x34] sm:$0xf]
  %v12653 = vld [vmem:[%s3 + $0x38] sm:$0xf]
  %v12654 = vld [vmem:[%s3 + $0x3c] sm:$0xf]
  %v12655 = vld [vmem:[%s3 + $0x40] sm:$0xf]
  %v12656 = vld [vmem:[%s3 + $0x44] sm:$0xf]
  %v12657 = vld [vmem:[%s3 + $0x48] sm:$0xf]
  %v12658 = vld [vmem:[%s3 + $0x4c] sm:$0xf]
  %v12659 = vld [vmem:[%s3 + $0x50] sm:$0xf]
  %v12660 = vld [vmem:[%s3 + $0x54] sm:$0xf]
  %v12661 = vld [vmem:[%s3 + $0x58] sm:$0xf]
  %v12662 = vld [vmem:[%s3 + $0x5c] sm:$0xf]
  %v12663 = vld [vmem:[%s3 + $0x60] sm:$0xf]
  %v12664 = vld [vmem:[%s3 + $0x64] sm:$0xf]
  %v12665 = vld [vmem:[%s3 + $0x68] sm:$0xf]
  %v12666 = vld [vmem:[%s3 + $0x6c] sm:$0xf]
  %v12667 = vld [vmem:[%s3 + $0x70] sm:$0xf]
  %v12668 = vld [vmem:[%s3 + $0x74] sm:$0xf]
  %v12669 = vld [vmem:[%s3 + $0x78] sm:$0xf]
  %v12670 = vld [vmem:[%s3 + $0x7c] sm:$0xf]
  %v12671 = vld [vmem:[%s3 + $0x80] sm:$0xf]
  %v12672 = vld [vmem:[%s3 + $0x84] sm:$0xf]
  %v12673 = vld [vmem:[%s3 + $0x88] sm:$0xf]
  %v12674 = vld [vmem:[%s3 + $0x8c] sm:$0xf]
  %v12675 = vld [vmem:[%s3 + $0x90] sm:$0xf]
  %v12676 = vld [vmem:[%s3 + $0x94] sm:$0xf]
  %v12677 = vld [vmem:[%s3 + $0x98] sm:$0xf]
  %v12678 = vld [vmem:[%s3 + $0x9c] sm:$0xf]
  %v12679 = vld [vmem:[%s3 + $0xa0] sm:$0xf]
  %v12680 = vld [vmem:[%s3 + $0xa4] sm:$0xf]
  %v12681 = vld [vmem:[%s3 + $0xa8] sm:$0xf]
  %v12682 = vld [vmem:[%s3 + $0xac] sm:$0xf]
  %v12683 = vld [vmem:[%s3 + $0xb0] sm:$0xf]
  %v12684 = vld [vmem:[%s3 + $0xb4] sm:$0xf]
  %v12685 = vld [vmem:[%s3 + $0xb8] sm:$0xf]
  %v12686 = vld [vmem:[%s3 + $0xbc] sm:$0xf]
  %v12687 = vld [vmem:[%s3 + $0xc0] sm:$0xf]
  %v12688 = vld [vmem:[%s3 + $0xc4] sm:$0xf]
  %v12689 = vld [vmem:[%s3 + $0xc8] sm:$0xf]
  %v12690 = vld [vmem:[%s3 + $0xcc] sm:$0xf]
  %v12691 = vld [vmem:[%s3 + $0xd0] sm:$0xf]
  %v12692 = vld [vmem:[%s3 + $0xd4] sm:$0xf]
  %v12693 = vld [vmem:[%s3 + $0xd8] sm:$0xf]
  %v12694 = vld [vmem:[%s3 + $0xdc] sm:$0xf]
  %v12695 = vld [vmem:[%s3 + $0xe0] sm:$0xf]
  %v12696 = vld [vmem:[%s3 + $0xe4] sm:$0xf]
  %v12697 = vld [vmem:[%s3 + $0xe8] sm:$0xf]
  %v12698 = vld [vmem:[%s3 + $0xec] sm:$0xf]
  %v12699 = vld [vmem:[%s3 + $0xf0] sm:$0xf]
  %v12700 = vld [vmem:[%s3 + $0xf4] sm:$0xf]
  %v12701 = vld [vmem:[%s3 + $0xf8] sm:$0x3]
  %v12702 = vld [vmem:[%s4] sm:$0x1]
  %v12704 = vlaneseq
  %v12705 = vshrl.u32 %v12704, 7
  %v12706 = vsub.s32 0, %v12705
  %v12707 = vrot.slane %v12702, %v12706
  %v12709 = vpack.c.b16 %v12387, %v12383
  %v12710 = vpack.c.b16 %v12388, %v12384
  %v12711 = vpack.c.b16 %v12389, %v12385
  %v12712 = vpack.c.b16 %v12390, %v12386
  %v12713 = vpack.c.b16 %v12395, %v12391
  %v12714 = vpack.c.b16 %v12396, %v12392
  %v12715 = vpack.c.b16 %v12397, %v12393
  %v12716 = vpack.c.b16 %v12398, %v12394
  %v12717 = vpack.c.b16 %v12403, %v12399
  %v12718 = vpack.c.b16 %v12404, %v12400
  %v12719 = vpack.c.b16 %v12405, %v12401
  %v12720 = vpack.c.b16 %v12406, %v12402
  %v12721 = vpack.c.b16 %v12411, %v12407
  %v12722 = vpack.c.b16 %v12412, %v12408
  %v12723 = vpack.c.b16 %v12413, %v12409
  %v12724 = vpack.c.b16 %v12414, %v12410
  %v12725 = vpack.c.b16 %v12419, %v12415
  %v12726 = vpack.c.b16 %v12420, %v12416
  %v12727 = vpack.c.b16 %v12421, %v12417
  %v12728 = vpack.c.b16 %v12422, %v12418
  %v12729 = vpack.c.b16 %v12427, %v12423
  %v12730 = vpack.c.b16 %v12428, %v12424
  %v12731 = vpack.c.b16 %v12429, %v12425
  %v12732 = vpack.c.b16 %v12430, %v12426
  %v12733 = vpack.c.b16 %v12435, %v12431
  %v12734 = vpack.c.b16 %v12436, %v12432
  %v12735 = vpack.c.b16 %v12437, %v12433
  %v12736 = vpack.c.b16 %v12438, %v12434
  %v12737 = vpack.c.b16 %v12443, %v12439
  %v12738 = vpack.c.b16 %v12444, %v12440
  %v12739 = vpack.c.b16 %v12445, %v12441
  %v12740 = vpack.c.b16 %v12446, %v12442
  %v12741 = vpack.c.b16 %v12451, %v12447
  %v12742 = vpack.c.b16 %v12452, %v12448
  %v12743 = vpack.c.b16 %v12453, %v12449
  %v12744 = vpack.c.b16 %v12454, %v12450
  %v12745 = vpack.c.b16 %v12459, %v12455
  %v12746 = vpack.c.b16 %v12460, %v12456
  %v12747 = vpack.c.b16 %v12461, %v12457
  %v12748 = vpack.c.b16 %v12462, %v12458
  %v12749 = vpack.c.b16 %v12467, %v12463
  %v12750 = vpack.c.b16 %v12468, %v12464
  %v12751 = vpack.c.b16 %v12469, %v12465
  %v12752 = vpack.c.b16 %v12470, %v12466
  %v12753 = vpack.c.b16 %v12475, %v12471
  %v12754 = vpack.c.b16 %v12476, %v12472
  %v12755 = vpack.c.b16 %v12477, %v12473
  %v12756 = vpack.c.b16 %v12478, %v12474
  %v12757 = vpack.c.b16 %v12483, %v12479
  %v12758 = vpack.c.b16 %v12484, %v12480
  %v12759 = vpack.c.b16 %v12485, %v12481
  %v12760 = vpack.c.b16 %v12486, %v12482
  %v12761 = vpack.c.b16 %v12491, %v12487
  %v12762 = vpack.c.b16 %v12492, %v12488
  %v12763 = vpack.c.b16 %v12493, %v12489
  %v12764 = vpack.c.b16 %v12494, %v12490
  %v12765 = vpack.c.b16 %v12499, %v12495
  %v12766 = vpack.c.b16 %v12500, %v12496
  %v12767 = vpack.c.b16 %v12501, %v12497
  %v12768 = vpack.c.b16 %v12502, %v12498
  %v12769 = vpack.c.b16 %v12507, %v12503
  %v12770 = vpack.c.b16 %v12508, %v12504
  %v12771 = vpack.c.b16 %v12509, %v12505
  %v12772 = vpack.c.b16 %v12510, %v12506
  %v12773 = vpack.c.b16 %v12515, %v12511
  %v12774 = vpack.c.b16 %v12516, %v12512
  %v12775 = vpack.c.b16 %v12517, %v12513
  %v12776 = vpack.c.b16 %v12518, %v12514
  %v12777 = vpack.c.b16 %v12523, %v12519
  %v12778 = vpack.c.b16 %v12524, %v12520
  %v12779 = vpack.c.b16 %v12525, %v12521
  %v12780 = vpack.c.b16 %v12526, %v12522
  %v12781 = vpack.c.b16 %v12531, %v12527
  %v12782 = vpack.c.b16 %v12532, %v12528
  %v12783 = vpack.c.b16 %v12533, %v12529
  %v12784 = vpack.c.b16 %v12534, %v12530
  %v12785 = vpack.c.b16 %v12539, %v12535
  %v12786 = vpack.c.b16 %v12540, %v12536
  %v12787 = vpack.c.b16 %v12541, %v12537
  %v12788 = vpack.c.b16 %v12542, %v12538
  %v12789 = vpack.c.b16 %v12547, %v12543
  %v12790 = vpack.c.b16 %v12548, %v12544
  %v12791 = vpack.c.b16 %v12549, %v12545
  %v12792 = vpack.c.b16 %v12550, %v12546
  %v12793 = vpack.c.b16 %v12555, %v12551
  %v12794 = vpack.c.b16 %v12556, %v12552
  %v12795 = vpack.c.b16 %v12557, %v12553
  %v12796 = vpack.c.b16 %v12558, %v12554
  %v12797 = vpack.c.b16 %v12563, %v12559
  %v12798 = vpack.c.b16 %v12564, %v12560
  %v12799 = vpack.c.b16 %v12565, %v12561
  %v12800 = vpack.c.b16 %v12566, %v12562
  %v12801 = vpack.c.b16 %v12571, %v12567
  %v12802 = vpack.c.b16 %v12572, %v12568
  %v12803 = vpack.c.b16 %v12573, %v12569
  %v12804 = vpack.c.b16 %v12574, %v12570
  %v12805 = vpack.c.b16 %v12579, %v12575
  %v12806 = vpack.c.b16 %v12580, %v12576
  %v12807 = vpack.c.b16 %v12581, %v12577
  %v12808 = vpack.c.b16 %v12582, %v12578
  %v12809 = vpack.c.b16 %v12587, %v12583
  %v12810 = vpack.c.b16 %v12588, %v12584
  %v12811 = vpack.c.b16 %v12589, %v12585
  %v12812 = vpack.c.b16 %v12590, %v12586
  %v12813 = vpack.c.b16 %v12595, %v12591
  %v12814 = vpack.c.b16 %v12596, %v12592
  %v12815 = vpack.c.b16 %v12597, %v12593
  %v12816 = vpack.c.b16 %v12598, %v12594
  %v12817 = vpack.c.b16 %v12603, %v12599
  %v12818 = vpack.c.b16 %v12604, %v12600
  %v12819 = vpack.c.b16 %v12605, %v12601
  %v12820 = vpack.c.b16 %v12606, %v12602
  %v12821 = vpack.c.b16 %v12611, %v12607
  %v12822 = vpack.c.b16 %v12612, %v12608
  %v12823 = vpack.c.b16 %v12613, %v12609
  %v12824 = vpack.c.b16 %v12614, %v12610
  %v12825 = vpack.c.b16 %v12619, %v12615
  %v12826 = vpack.c.b16 %v12620, %v12616
  %v12827 = vpack.c.b16 %v12621, %v12617
  %v12828 = vpack.c.b16 %v12622, %v12618
  %v12829 = vpack.c.b16 %v12627, %v12623
  %v12830 = vpack.c.b16 %v12628, %v12624
  %v12831 = vpack.c.b16 %v12629, %v12625
  %v12832 = vpack.c.b16 %v12630, %v12626
  %v12833 = vpack.c.b16 %v12635, %v12631
  %v12834 = vpack.c.b16 %v12636, %v12632
  %v12835 = vpack.c.b16 %v12637, %v12633
  %v12836 = vpack.c.b16 %v12638, %v12634
  %v12996 = vunpack.c.l.b16 %v12639
  %v12997 = vunpack.c.l.b16 %v12640
  %v12998 = vunpack.c.l.b16 %v12641
  %v12999 = vunpack.c.l.b16 %v12642
  %v13000 = vunpack.c.l.b16 %v12643
  %v13001 = vunpack.c.l.b16 %v12644
  %v13002 = vunpack.c.l.b16 %v12645
  %v13003 = vunpack.c.l.b16 %v12646
  %v13004 = vunpack.c.l.b16 %v12647
  %v13005 = vunpack.c.l.b16 %v12648
  %v13006 = vunpack.c.l.b16 %v12649
  %v13007 = vunpack.c.l.b16 %v12650
  %v13008 = vunpack.c.l.b16 %v12651
  %v13009 = vunpack.c.l.b16 %v12652
  %v13010 = vunpack.c.l.b16 %v12653
  %v13011 = vunpack.c.l.b16 %v12654
  %v13012 = vunpack.c.l.b16 %v12655
  %v13013 = vunpack.c.l.b16 %v12656
  %v13014 = vunpack.c.l.b16 %v12657
  %v13015 = vunpack.c.l.b16 %v12658
  %v13016 = vunpack.c.l.b16 %v12659
  %v13017 = vunpack.c.l.b16 %v12660
  %v13018 = vunpack.c.l.b16 %v12661
  %v13019 = vunpack.c.l.b16 %v12662
  %v13020 = vunpack.c.l.b16 %v12663
  %v13021 = vunpack.c.l.b16 %v12664
  %v13022 = vunpack.c.l.b16 %v12665
  %v13023 = vunpack.c.l.b16 %v12666
  %v13024 = vunpack.c.l.b16 %v12667
  %v13025 = vunpack.c.l.b16 %v12668
  %v13026 = vunpack.c.l.b16 %v12669
  %v13027 = vunpack.c.l.b16 %v12670
  %v13028 = vunpack.c.l.b16 %v12671
  %v13029 = vunpack.c.l.b16 %v12672
  %v13030 = vunpack.c.l.b16 %v12673
  %v13031 = vunpack.c.l.b16 %v12674
  %v13032 = vunpack.c.l.b16 %v12675
  %v13033 = vunpack.c.l.b16 %v12676
  %v13034 = vunpack.c.l.b16 %v12677
  %v13035 = vunpack.c.l.b16 %v12678
  %v13036 = vunpack.c.l.b16 %v12679
  %v13037 = vunpack.c.l.b16 %v12680
  %v13038 = vunpack.c.l.b16 %v12681
  %v13039 = vunpack.c.l.b16 %v12682
  %v13040 = vunpack.c.l.b16 %v12683
  %v13041 = vunpack.c.l.b16 %v12684
  %v13042 = vunpack.c.l.b16 %v12685
  %v13043 = vunpack.c.l.b16 %v12686
  %v13044 = vunpack.c.l.b16 %v12687
  %v13045 = vunpack.c.l.b16 %v12688
  %v13046 = vunpack.c.l.b16 %v12689
  %v13047 = vunpack.c.l.b16 %v12690
  %v13048 = vunpack.c.l.b16 %v12691
  %v13049 = vunpack.c.l.b16 %v12692
  %v13050 = vunpack.c.l.b16 %v12693
  %v13051 = vunpack.c.l.b16 %v12694
  %v13052 = vunpack.c.l.b16 %v12695
  %v13053 = vunpack.c.l.b16 %v12696
  %v13054 = vunpack.c.l.b16 %v12697
  %v13055 = vunpack.c.l.b16 %v12698
  %v13056 = vunpack.c.l.b16 %v12699
  %v13057 = vunpack.c.l.b16 %v12700
  %v13058 = vunpack.c.l.b16 %v12701
  %v13059 = vpack.c.b16 %v12997, %v12996
  %v13060 = vpack.c.b16 %v12999, %v12998
  %v13061 = vpack.c.b16 %v13001, %v13000
  %v13062 = vpack.c.b16 %v13003, %v13002
  %v13063 = vpack.c.b16 %v13005, %v13004
  %v13064 = vpack.c.b16 %v13007, %v13006
  %v13065 = vpack.c.b16 %v13009, %v13008
  %v13066 = vpack.c.b16 %v13011, %v13010
  %v13067 = vpack.c.b16 %v13013, %v13012
  %v13068 = vpack.c.b16 %v13015, %v13014
  %v13069 = vpack.c.b16 %v13017, %v13016
  %v13070 = vpack.c.b16 %v13019, %v13018
  %v13071 = vpack.c.b16 %v13021, %v13020
  %v13072 = vpack.c.b16 %v13023, %v13022
  %v13073 = vpack.c.b16 %v13025, %v13024
  %v13074 = vpack.c.b16 %v13027, %v13026
  %v13075 = vpack.c.b16 %v13029, %v13028
  %v13076 = vpack.c.b16 %v13031, %v13030
  %v13077 = vpack.c.b16 %v13033, %v13032
  %v13078 = vpack.c.b16 %v13035, %v13034
  %v13079 = vpack.c.b16 %v13037, %v13036
  %v13080 = vpack.c.b16 %v13039, %v13038
  %v13081 = vpack.c.b16 %v13041, %v13040
  %v13082 = vpack.c.b16 %v13043, %v13042
  %v13083 = vpack.c.b16 %v13045, %v13044
  %v13084 = vpack.c.b16 %v13047, %v13046
  %v13085 = vpack.c.b16 %v13049, %v13048
  %v13086 = vpack.c.b16 %v13051, %v13050
  %v13087 = vpack.c.b16 %v13053, %v13052
  %v13088 = vpack.c.b16 %v13055, %v13054
  %v13089 = vpack.c.b16 %v13057, %v13056
  %v13090 = vpack.c.b16 %v13058, %v13058
  %vm13122 = vcmask 949248
  %v13124 = vsel %vm13122, %v12712, 0
  %v13127 = vsel %vm13122, %v12716, 0
  %v13130 = vsel %vm13122, %v12720, 0
  %v13133 = vsel %vm13122, %v12724, 0
  %v13136 = vsel %vm13122, %v12728, 0
  %v13139 = vsel %vm13122, %v12732, 0
  %v13142 = vsel %vm13122, %v12736, 0
  %v13145 = vsel %vm13122, %v12740, 0
  %v13148 = vsel %vm13122, %v12744, 0
  %v13151 = vsel %vm13122, %v12748, 0
  %v13154 = vsel %vm13122, %v12752, 0
  %v13157 = vsel %vm13122, %v12756, 0
  %v13160 = vsel %vm13122, %v12760, 0
  %v13163 = vsel %vm13122, %v12764, 0
  %v13166 = vsel %vm13122, %v12768, 0
  %v13169 = vsel %vm13122, %v12772, 0
  %v13172 = vsel %vm13122, %v12776, 0
  %v13175 = vsel %vm13122, %v12780, 0
  %v13178 = vsel %vm13122, %v12784, 0
  %v13181 = vsel %vm13122, %v12788, 0
  %v13184 = vsel %vm13122, %v12792, 0
  %v13187 = vsel %vm13122, %v12796, 0
  %v13190 = vsel %vm13122, %v12800, 0
  %v13193 = vsel %vm13122, %v12804, 0
  %v13196 = vsel %vm13122, %v12808, 0
  %v13199 = vsel %vm13122, %v12812, 0
  %v13202 = vsel %vm13122, %v12816, 0
  %v13205 = vsel %vm13122, %v12820, 0
  %v13208 = vsel %vm13122, %v12824, 0
  %v13211 = vsel %vm13122, %v12828, 0
  %v13214 = vsel %vm13122, %v12832, 0
  %v13217 = vsel %vm13122, %v12836, 0
  %vm13219 = vcmask 1041408
  %v13221 = vsel %vm13219, %v13090, 0
  %13223 = vmatprep.subr.bf16.mxu0 0
  %13224 = vmatpush1.bf16.msra.mxu0 %v13059
  %13225 = vmatprep.subr.bf16.mxu0 0
  %13226 = vmatpush1.bf16.msra.mxu0 %v13060
  %13227 = vmatprep.subr.bf16.mxu0 0
  %13228 = vmatpush1.bf16.msra.mxu0 %v13061
  %13229 = vmatprep.subr.bf16.mxu0 0
  %13230 = vmatpush1.bf16.msra.mxu0 %v13062
  %13231 = vmatprep.subr.bf16.mxu0 0
  %13232 = vmatpush1.bf16.msra.mxu0 %v13063
  %13233 = vmatprep.subr.bf16.mxu0 0
  %13234 = vmatpush1.bf16.msra.mxu0 %v13064
  %13235 = vmatprep.subr.bf16.mxu0 0
  %13236 = vmatpush1.bf16.msra.mxu0 %v13065
  %13237 = vmatprep.subr.bf16.mxu0 0
  %13238 = vmatpush1.bf16.msra.mxu0 %v13066
  %13239 = vmatprep.subr.bf16.mxu0 0
  %13240 = vmatpush1.bf16.msra.mxu0 %v13067
  %13241 = vmatprep.subr.bf16.mxu0 0
  %13242 = vmatpush1.bf16.msra.mxu0 %v13068
  %13243 = vmatprep.subr.bf16.mxu0 0
  %13244 = vmatpush1.bf16.msra.mxu0 %v13069
  %13245 = vmatprep.subr.bf16.mxu0 0
  %13246 = vmatpush1.bf16.msra.mxu0 %v13070
  %13247 = vmatprep.subr.bf16.mxu0 0
  %13248 = vmatpush1.bf16.msra.mxu0 %v13071
  %13249 = vmatprep.subr.bf16.mxu0 0
  %13250 = vmatpush1.bf16.msra.mxu0 %v13072
  %13251 = vmatprep.subr.bf16.mxu0 0
  %13252 = vmatpush1.bf16.msra.mxu0 %v13073
  %13253 = vmatprep.subr.bf16.mxu0 0
  %13254 = vmatpush1.bf16.msra.mxu0 %v13074
  %13255 = vmatprep.mubr.bf16.mxu0 %v12710
  %13256 = vmatmul.mubr.bf16.gmra.mrb[0].mxu0 %v12709
  %v13257 = vpop.f32.mrb[0].mxu0
  %v13258 = vadd.f32 %v12707, %v13257
  %v13259 = vpop.f32.mrb[0].mxu0
  %v13260 = vpop.f32.mrb[0].mxu0
  %v13261 = vadd.f32 %v12707, %v13260
  %v13262 = vpop.f32.mrb[0].mxu0
  %13263 = vmatprep.mubr.bf16.mxu0 %v12714
  %13264 = vmatmul.mubr.bf16.gmra.mrb[0].mxu0 %v12713
  %v13265 = vpop.f32.mrb[0].mxu0
  %v13266 = vadd.f32 %v12707, %v13265
  %v13267 = vpop.f32.mrb[0].mxu0
  %v13268 = vpop.f32.mrb[0].mxu0
  %v13269 = vadd.f32 %v12707, %v13268
  %v13270 = vpop.f32.mrb[0].mxu0
  %13271 = vmatprep.mubr.bf16.mxu0 %v12718
  %13272 = vmatmul.mubr.bf16.gmra.mrb[0].mxu0 %v12717
  %v13273 = vpop.f32.mrb[0].mxu0
  %v13274 = vadd.f32 %v12707, %v13273
  %v13275 = vpop.f32.mrb[0].mxu0
  %v13276 = vpop.f32.mrb[0].mxu0
  %v13277 = vadd.f32 %v12707, %v13276
  %v13278 = vpop.f32.mrb[0].mxu0
  %13279 = vmatprep.mubr.bf16.mxu0 %v12722
  %13280 = vmatmul.mubr.bf16.gmra.mrb[0].mxu0 %v12721
  %v13281 = vpop.f32.mrb[0].mxu0
  %v13282 = vadd.f32 %v12707, %v13281
  %v13283 = vpop.f32.mrb[0].mxu0
  %v13284 = vpop.f32.mrb[0].mxu0
  %v13285 = vadd.f32 %v12707, %v13284
  %v13286 = vpop.f32.mrb[0].mxu0
  %13287 = vmatprep.mubr.bf16.mxu0 %v12726
  %13288 = vmatmul.mubr.bf16.gmra.mrb[0].mxu0 %v12725
  %v13289 = vpop.f32.mrb[0].mxu0
  %v13290 = vadd.f32 %v12707, %v13289
  %v13291 = vpop.f32.mrb[0].mxu0
  %v13292 = vpop.f32.mrb[0].mxu0
  %v13293 = vadd.f32 %v12707, %v13292
  %v13294 = vpop.f32.mrb[0].mxu0
  %13295 = vmatprep.mubr.bf16.mxu0 %v12730
  %13296 = vmatmul.mubr.bf16.gmra.mrb[0].mxu0 %v12729
  %v13297 = vpop.f32.mrb[0].mxu0
  %v13298 = vadd.f32 %v12707, %v13297
  %v13299 = vpop.f32.mrb[0].mxu0
  %v13300 = vpop.f32.mrb[0].mxu0
  %v13301 = vadd.f32 %v12707, %v13300
  %v13302 = vpop.f32.mrb[0].mxu0
  %13303 = vmatprep.mubr.bf16.mxu0 %v12734
  %13304 = vmatmul.mubr.bf16.gmra.mrb[0].mxu0 %v12733
  %v13305 = vpop.f32.mrb[0].mxu0
  %v13306 = vadd.f32 %v12707, %v13305
  %v13307 = vpop.f32.mrb[0].mxu0
  %v13308 = vpop.f32.mrb[0].mxu0
  %v13309 = vadd.f32 %v12707, %v13308
  %v13310 = vpop.f32.mrb[0].mxu0
  %13311 = vmatprep.mubr.bf16.mxu0 %v12738
  %13312 = vmatmul.mubr.bf16.gmra.mrb[0].mxu0 %v12737
  %v13313 = vpop.f32.mrb[0].mxu0
  %v13314 = vadd.f32 %v12707, %v13313
  %v13315 = vpop.f32.mrb[0].mxu0
  %v13316 = vpop.f32.mrb[0].mxu0
  %v13317 = vadd.f32 %v12707, %v13316
  %v13318 = vpop.f32.mrb[0].mxu0
  %13319 = vmatprep.mubr.bf16.mxu0 %v12742
  %13320 = vmatmul.mubr.bf16.gmra.mrb[0].mxu0 %v12741
  %v13321 = vpop.f32.mrb[0].mxu0
  %v13322 = vadd.f32 %v12707, %v13321
  %v13323 = vpop.f32.mrb[0].mxu0
  %v13324 = vpop.f32.mrb[0].mxu0
  %v13325 = vadd.f32 %v12707, %v13324
  %v13326 = vpop.f32.mrb[0].mxu0
  %13327 = vmatprep.mubr.bf16.mxu0 %v12746
  %13328 = vmatmul.mubr.bf16.gmra.mrb[0].mxu0 %v12745
  %v13329 = vpop.f32.mrb[0].mxu0
  %v13330 = vadd.f32 %v12707, %v13329
  %v13331 = vpop.f32.mrb[0].mxu0
  %v13332 = vpop.f32.mrb[0].mxu0
  %v13333 = vadd.f32 %v12707, %v13332
  %v13334 = vpop.f32.mrb[0].mxu0
  %13335 = vmatprep.mubr.bf16.mxu0 %v12750
  %13336 = vmatmul.mubr.bf16.gmra.mrb[0].mxu0 %v12749
  %v13337 = vpop.f32.mrb[0].mxu0
  %v13338 = vadd.f32 %v12707, %v13337
  %v13339 = vpop.f32.mrb[0].mxu0
  %v13340 = vpop.f32.mrb[0].mxu0
  %v13341 = vadd.f32 %v12707, %v13340
  %v13342 = vpop.f32.mrb[0].mxu0
  %13343 = vmatprep.mubr.bf16.mxu0 %v12754
  %13344 = vmatmul.mubr.bf16.gmra.mrb[0].mxu0 %v12753
  %v13345 = vpop.f32.mrb[0].mxu0
  %v13346 = vadd.f32 %v12707, %v13345
  %v13347 = vpop.f32.mrb[0].mxu0
  %v13348 = vpop.f32.mrb[0].mxu0
  %v13349 = vadd.f32 %v12707, %v13348
  %v13350 = vpop.f32.mrb[0].mxu0
  %13351 = vmatprep.mubr.bf16.mxu0 %v12758
  %13352 = vmatmul.mubr.bf16.gmra.mrb[0].mxu0 %v12757
  %v13353 = vpop.f32.mrb[0].mxu0
  %v13354 = vadd.f32 %v12707, %v13353
  %v13355 = vpop.f32.mrb[0].mxu0
  %v13356 = vpop.f32.mrb[0].mxu0
  %v13357 = vadd.f32 %v12707, %v13356
  %v13358 = vpop.f32.mrb[0].mxu0
  %13359 = vmatprep.mubr.bf16.mxu0 %v12762
  %13360 = vmatmul.mubr.bf16.gmra.mrb[0].mxu0 %v12761
  %v13361 = vpop.f32.mrb[0].mxu0
  %v13362 = vadd.f32 %v12707, %v13361
  %v13363 = vpop.f32.mrb[0].mxu0
  %v13364 = vpop.f32.mrb[0].mxu0
  %v13365 = vadd.f32 %v12707, %v13364
  %v13366 = vpop.f32.mrb[0].mxu0
  %13367 = vmatprep.mubr.bf16.mxu0 %v12766
  %13368 = vmatmul.mubr.bf16.gmra.mrb[0].mxu0 %v12765
  %v13369 = vpop.f32.mrb[0].mxu0
  %v13370 = vadd.f32 %v12707, %v13369
  %v13371 = vpop.f32.mrb[0].mxu0
  %v13372 = vpop.f32.mrb[0].mxu0
  %v13373 = vadd.f32 %v12707, %v13372
  %v13374 = vpop.f32.mrb[0].mxu0
  %13375 = vmatprep.mubr.bf16.mxu0 %v12770
  %13376 = vmatmul.mubr.bf16.gmra.mrb[0].mxu0 %v12769
  %v13377 = vpop.f32.mrb[0].mxu0
  %v13378 = vadd.f32 %v12707, %v13377
  %v13379 = vpop.f32.mrb[0].mxu0
  %v13380 = vpop.f32.mrb[0].mxu0
  %v13381 = vadd.f32 %v12707, %v13380
  %v13382 = vpop.f32.mrb[0].mxu0
  %13383 = vmatprep.mubr.bf16.mxu0 %v12774
  %13384 = vmatmul.mubr.bf16.gmra.mrb[0].mxu0 %v12773
  %v13385 = vpop.f32.mrb[0].mxu0
  %v13386 = vadd.f32 %v12707, %v13385
  %v13387 = vpop.f32.mrb[0].mxu0
  %v13388 = vpop.f32.mrb[0].mxu0
  %v13389 = vadd.f32 %v12707, %v13388
  %v13390 = vpop.f32.mrb[0].mxu0
  %13391 = vmatprep.mubr.bf16.mxu0 %v12778
  %13392 = vmatmul.mubr.bf16.gmra.mrb[0].mxu0 %v12777
  %v13393 = vpop.f32.mrb[0].mxu0
  %v13394 = vadd.f32 %v12707, %v13393
  %v13395 = vpop.f32.mrb[0].mxu0
  %v13396 = vpop.f32.mrb[0].mxu0
  %v13397 = vadd.f32 %v12707, %v13396
  %v13398 = vpop.f32.mrb[0].mxu0
  %13399 = vmatprep.mubr.bf16.mxu0 %v12782
  %13400 = vmatmul.mubr.bf16.gmra.mrb[0].mxu0 %v12781
  %v13401 = vpop.f32.mrb[0].mxu0
  %v13402 = vadd.f32 %v12707, %v13401
  %v13403 = vpop.f32.mrb[0].mxu0
  %v13404 = vpop.f32.mrb[0].mxu0
  %v13405 = vadd.f32 %v12707, %v13404
  %v13406 = vpop.f32.mrb[0].mxu0
  %13407 = vmatprep.mubr.bf16.mxu0 %v12786
  %13408 = vmatmul.mubr.bf16.gmra.mrb[0].mxu0 %v12785
  %v13409 = vpop.f32.mrb[0].mxu0
  %v13410 = vadd.f32 %v12707, %v13409
  %v13411 = vpop.f32.mrb[0].mxu0
  %v13412 = vpop.f32.mrb[0].mxu0
  %v13413 = vadd.f32 %v12707, %v13412
  %v13414 = vpop.f32.mrb[0].mxu0
  %13415 = vmatprep.mubr.bf16.mxu0 %v12790
  %13416 = vmatmul.mubr.bf16.gmra.mrb[0].mxu0 %v12789
  %v13417 = vpop.f32.mrb[0].mxu0
  %v13418 = vadd.f32 %v12707, %v13417
  %v13419 = vpop.f32.mrb[0].mxu0
  %v13420 = vpop.f32.mrb[0].mxu0
  %v13421 = vadd.f32 %v12707, %v13420
  %v13422 = vpop.f32.mrb[0].mxu0
  %13423 = vmatprep.mubr.bf16.mxu0 %v12794
  %13424 = vmatmul.mubr.bf16.gmra.mrb[0].mxu0 %v12793
  %v13425 = vpop.f32.mrb[0].mxu0
  %v13426 = vadd.f32 %v12707, %v13425
  %v13427 = vpop.f32.mrb[0].mxu0
  %v13428 = vpop.f32.mrb[0].mxu0
  %v13429 = vadd.f32 %v12707, %v13428
  %v13430 = vpop.f32.mrb[0].mxu0
  %13431 = vmatprep.mubr.bf16.mxu0 %v12798
  %13432 = vmatmul.mubr.bf16.gmra.mrb[0].mxu0 %v12797
  %v13433 = vpop.f32.mrb[0].mxu0
  %v13434 = vadd.f32 %v12707, %v13433
  %v13435 = vpop.f32.mrb[0].mxu0
  %v13436 = vpop.f32.mrb[0].mxu0
  %v13437 = vadd.f32 %v12707, %v13436
  %v13438 = vpop.f32.mrb[0].mxu0
  %13439 = vmatprep.mubr.bf16.mxu0 %v12802
  %13440 = vmatmul.mubr.bf16.gmra.mrb[0].mxu0 %v12801
  %v13441 = vpop.f32.mrb[0].mxu0
  %v13442 = vadd.f32 %v12707, %v13441
  %v13443 = vpop.f32.mrb[0].mxu0
  %v13444 = vpop.f32.mrb[0].mxu0
  %v13445 = vadd.f32 %v12707, %v13444
  %v13446 = vpop.f32.mrb[0].mxu0
  %13447 = vmatprep.mubr.bf16.mxu0 %v12806
  %13448 = vmatmul.mubr.bf16.gmra.mrb[0].mxu0 %v12805
  %v13449 = vpop.f32.mrb[0].mxu0
  %v13450 = vadd.f32 %v12707, %v13449
  %v13451 = vpop.f32.mrb[0].mxu0
  %v13452 = vpop.f32.mrb[0].mxu0
  %v13453 = vadd.f32 %v12707, %v13452
  %v13454 = vpop.f32.mrb[0].mxu0
  %13455 = vmatprep.mubr.bf16.mxu0 %v12810
  %13456 = vmatmul.mubr.bf16.gmra.mrb[0].mxu0 %v12809
  %v13457 = vpop.f32.mrb[0].mxu0
  %v13458 = vadd.f32 %v12707, %v13457
  %v13459 = vpop.f32.mrb[0].mxu0
  %v13460 = vpop.f32.mrb[0].mxu0
  %v13461 = vadd.f32 %v12707, %v13460
  %v13462 = vpop.f32.mrb[0].mxu0
  %13463 = vmatprep.mubr.bf16.mxu0 %v12814
  %13464 = vmatmul.mubr.bf16.gmra.mrb[0].mxu0 %v12813
  %v13465 = vpop.f32.mrb[0].mxu0
  %v13466 = vadd.f32 %v12707, %v13465
  %v13467 = vpop.f32.mrb[0].mxu0
  %v13468 = vpop.f32.mrb[0].mxu0
  %v13469 = vadd.f32 %v12707, %v13468
  %v13470 = vpop.f32.mrb[0].mxu0
  %13471 = vmatprep.mubr.bf16.mxu0 %v12818
  %13472 = vmatmul.mubr.bf16.gmra.mrb[0].mxu0 %v12817
  %v13473 = vpop.f32.mrb[0].mxu0
  %v13474 = vadd.f32 %v12707, %v13473
  %v13475 = vpop.f32.mrb[0].mxu0
  %v13476 = vpop.f32.mrb[0].mxu0
  %v13477 = vadd.f32 %v12707, %v13476
  %v13478 = vpop.f32.mrb[0].mxu0
  %13479 = vmatprep.mubr.bf16.mxu0 %v12822
  %13480 = vmatmul.mubr.bf16.gmra.mrb[0].mxu0 %v12821
  %v13481 = vpop.f32.mrb[0].mxu0
  %v13482 = vadd.f32 %v12707, %v13481
  %v13483 = vpop.f32.mrb[0].mxu0
  %v13484 = vpop.f32.mrb[0].mxu0
  %v13485 = vadd.f32 %v12707, %v13484
  %v13486 = vpop.f32.mrb[0].mxu0
  %13487 = vmatprep.mubr.bf16.mxu0 %v12826
  %13488 = vmatmul.mubr.bf16.gmra.mrb[0].mxu0 %v12825
  %v13489 = vpop.f32.mrb[0].mxu0
  %v13490 = vadd.f32 %v12707, %v13489
  %v13491 = vpop.f32.mrb[0].mxu0
  %v13492 = vpop.f32.mrb[0].mxu0
  %v13493 = vadd.f32 %v12707, %v13492
  %v13494 = vpop.f32.mrb[0].mxu0
  %13495 = vmatprep.mubr.bf16.mxu0 %v12830
  %13496 = vmatmul.mubr.bf16.gmra.mrb[0].mxu0 %v12829
  %v13497 = vpop.f32.mrb[0].mxu0
  %v13498 = vadd.f32 %v12707, %v13497
  %v13499 = vpop.f32.mrb[0].mxu0
  %v13500 = vpop.f32.mrb[0].mxu0
  %v13501 = vadd.f32 %v12707, %v13500
  %v13502 = vpop.f32.mrb[0].mxu0
  %13503 = vmatprep.mubr.bf16.mxu0 %v12834
  %13504 = vmatmul.mubr.bf16.gmra.mrb[0].mxu0 %v12833
  %v13505 = vpop.f32.mrb[0].mxu0
  %v13506 = vadd.f32 %v12707, %v13505
  %v13507 = vpop.f32.mrb[0].mxu0
  %v13508 = vpop.f32.mrb[0].mxu0
  %v13509 = vadd.f32 %v12707, %v13508
  %v13510 = vpop.f32.mrb[0].mxu0
  %13511 = vdwg.mxu0
  %13512 = vmatprep.subr.bf16.mxu0 0
  %13513 = vmatpush1.bf16.msra.mxu0 %v13075
  %13514 = vmatprep.subr.bf16.mxu0 0
  %13515 = vmatpush1.bf16.msra.mxu0 %v13076
  %13516 = vmatprep.subr.bf16.mxu0 0
  %13517 = vmatpush1.bf16.msra.mxu0 %v13077
  %13518 = vmatprep.subr.bf16.mxu0 0
  %13519 = vmatpush1.bf16.msra.mxu0 %v13078
  %13520 = vmatprep.subr.bf16.mxu0 0
  %13521 = vmatpush1.bf16.msra.mxu0 %v13079
  %13522 = vmatprep.subr.bf16.mxu0 0
  %13523 = vmatpush1.bf16.msra.mxu0 %v13080
  %13524 = vmatprep.subr.bf16.mxu0 0
  %13525 = vmatpush1.bf16.msra.mxu0 %v13081
  %13526 = vmatprep.subr.bf16.mxu0 0
  %13527 = vmatpush1.bf16.msra.mxu0 %v13082
  %13528 = vmatprep.subr.bf16.mxu0 0
  %13529 = vmatpush1.bf16.msra.mxu0 %v13083
  %13530 = vmatprep.subr.bf16.mxu0 0
  %13531 = vmatpush1.bf16.msra.mxu0 %v13084
  %13532 = vmatprep.subr.bf16.mxu0 0
  %13533 = vmatpush1.bf16.msra.mxu0 %v13085
  %13534 = vmatprep.subr.bf16.mxu0 0
  %13535 = vmatpush1.bf16.msra.mxu0 %v13086
  %13536 = vmatprep.subr.bf16.mxu0 0
  %13537 = vmatpush1.bf16.msra.mxu0 %v13087
  %13538 = vmatprep.subr.bf16.mxu0 0
  %13539 = vmatpush1.bf16.msra.mxu0 %v13088
  %13540 = vmatprep.subr.bf16.mxu0 0
  %13541 = vmatpush1.bf16.msra.mxu0 %v13089
  %13542 = vmatprep.subr.bf16.mxu0 0
  %13543 = vmatpush1.bf16.msra.mxu0 %v13221
  %13544 = vmatprep.mubr.bf16.mxu0 %v13124
  %13545 = vmatmul.mubr.bf16.gmra.mrb[0].mxu0 %v12711
  %v13546 = vpop.f32.mrb[0].mxu0
  %v13547 = vadd.f32 %v13258, %v13546
  %v13548 = vpop.f32.mrb[0].mxu0
  %v13549 = vpop.f32.mrb[0].mxu0
  %v13550 = vadd.f32 %v13261, %v13549
  %v13551 = vpop.f32.mrb[0].mxu0
  %13552 = vmatprep.mubr.bf16.mxu0 %v13127
  %13553 = vmatmul.mubr.bf16.gmra.mrb[0].mxu0 %v12715
  %v13554 = vpop.f32.mrb[0].mxu0
  %v13555 = vadd.f32 %v13266, %v13554
  %v13556 = vpop.f32.mrb[0].mxu0
  %v13557 = vpop.f32.mrb[0].mxu0
  %v13558 = vadd.f32 %v13269, %v13557
  %v13559 = vpop.f32.mrb[0].mxu0
  %13560 = vmatprep.mubr.bf16.mxu0 %v13130
  %13561 = vmatmul.mubr.bf16.gmra.mrb[0].mxu0 %v12719
  %v13562 = vpop.f32.mrb[0].mxu0
  %v13563 = vadd.f32 %v13274, %v13562
  %v13564 = vpop.f32.mrb[0].mxu0
  %v13565 = vpop.f32.mrb[0].mxu0
  %v13566 = vadd.f32 %v13277, %v13565
  %v13567 = vpop.f32.mrb[0].mxu0
  %13568 = vmatprep.mubr.bf16.mxu0 %v13133
  %13569 = vmatmul.mubr.bf16.gmra.mrb[0].mxu0 %v12723
  %v13570 = vpop.f32.mrb[0].mxu0
  %v13571 = vadd.f32 %v13282, %v13570
  %v13572 = vpop.f32.mrb[0].mxu0
  %v13573 = vpop.f32.mrb[0].mxu0
  %v13574 = vadd.f32 %v13285, %v13573
  %v13575 = vpop.f32.mrb[0].mxu0
  %13576 = vmatprep.mubr.bf16.mxu0 %v13136
  %13577 = vmatmul.mubr.bf16.gmra.mrb[0].mxu0 %v12727
  %v13578 = vpop.f32.mrb[0].mxu0
  %v13579 = vadd.f32 %v13290, %v13578
  %v13580 = vpop.f32.mrb[0].mxu0
  %v13581 = vpop.f32.mrb[0].mxu0
  %v13582 = vadd.f32 %v13293, %v13581
  %v13583 = vpop.f32.mrb[0].mxu0
  %13584 = vmatprep.mubr.bf16.mxu0 %v13139
  %13585 = vmatmul.mubr.bf16.gmra.mrb[0].mxu0 %v12731
  %v13586 = vpop.f32.mrb[0].mxu0
  %v13587 = vadd.f32 %v13298, %v13586
  %v13588 = vpop.f32.mrb[0].mxu0
  %v13589 = vpop.f32.mrb[0].mxu0
  %v13590 = vadd.f32 %v13301, %v13589
  %v13591 = vpop.f32.mrb[0].mxu0
  %13592 = vmatprep.mubr.bf16.mxu0 %v13142
  %13593 = vmatmul.mubr.bf16.gmra.mrb[0].mxu0 %v12735
  %v13594 = vpop.f32.mrb[0].mxu0
  %v13595 = vadd.f32 %v13306, %v13594
  %v13596 = vpop.f32.mrb[0].mxu0
  %v13597 = vpop.f32.mrb[0].mxu0
  %v13598 = vadd.f32 %v13309, %v13597
  %v13599 = vpop.f32.mrb[0].mxu0
  %13600 = vmatprep.mubr.bf16.mxu0 %v13145
  %13601 = vmatmul.mubr.bf16.gmra.mrb[0].mxu0 %v12739
  %v13602 = vpop.f32.mrb[0].mxu0
  %v13603 = vadd.f32 %v13314, %v13602
  %v13604 = vpop.f32.mrb[0].mxu0
  %v13605 = vpop.f32.mrb[0].mxu0
  %v13606 = vadd.f32 %v13317, %v13605
  %v13607 = vpop.f32.mrb[0].mxu0
  %13608 = vmatprep.mubr.bf16.mxu0 %v13148
  %13609 = vmatmul.mubr.bf16.gmra.mrb[0].mxu0 %v12743
  %v13610 = vpop.f32.mrb[0].mxu0
  %v13611 = vadd.f32 %v13322, %v13610
  %v13612 = vpop.f32.mrb[0].mxu0
  %v13613 = vpop.f32.mrb[0].mxu0
  %v13614 = vadd.f32 %v13325, %v13613
  %v13615 = vpop.f32.mrb[0].mxu0
  %13616 = vmatprep.mubr.bf16.mxu0 %v13151
  %13617 = vmatmul.mubr.bf16.gmra.mrb[0].mxu0 %v12747
  %v13618 = vpop.f32.mrb[0].mxu0
  %v13619 = vadd.f32 %v13330, %v13618
  %v13620 = vpop.f32.mrb[0].mxu0
  %v13621 = vpop.f32.mrb[0].mxu0
  %v13622 = vadd.f32 %v13333, %v13621
  %v13623 = vpop.f32.mrb[0].mxu0
  %13624 = vmatprep.mubr.bf16.mxu0 %v13154
  %13625 = vmatmul.mubr.bf16.gmra.mrb[0].mxu0 %v12751
  %v13626 = vpop.f32.mrb[0].mxu0
  %v13627 = vadd.f32 %v13338, %v13626
  %v13628 = vpop.f32.mrb[0].mxu0
  %v13629 = vpop.f32.mrb[0].mxu0
  %v13630 = vadd.f32 %v13341, %v13629
  %v13631 = vpop.f32.mrb[0].mxu0
  %13632 = vmatprep.mubr.bf16.mxu0 %v13157
  %13633 = vmatmul.mubr.bf16.gmra.mrb[0].mxu0 %v12755
  %v13634 = vpop.f32.mrb[0].mxu0
  %v13635 = vadd.f32 %v13346, %v13634
  %v13636 = vpop.f32.mrb[0].mxu0
  %v13637 = vpop.f32.mrb[0].mxu0
  %v13638 = vadd.f32 %v13349, %v13637
  %v13639 = vpop.f32.mrb[0].mxu0
  %13640 = vmatprep.mubr.bf16.mxu0 %v13160
  %13641 = vmatmul.mubr.bf16.gmra.mrb[0].mxu0 %v12759
  %v13642 = vpop.f32.mrb[0].mxu0
  %v13643 = vadd.f32 %v13354, %v13642
  %v13644 = vpop.f32.mrb[0].mxu0
  %v13645 = vpop.f32.mrb[0].mxu0
  %v13646 = vadd.f32 %v13357, %v13645
  %v13647 = vpop.f32.mrb[0].mxu0
  %13648 = vmatprep.mubr.bf16.mxu0 %v13163
  %13649 = vmatmul.mubr.bf16.gmra.mrb[0].mxu0 %v12763
  %v13650 = vpop.f32.mrb[0].mxu0
  %v13651 = vadd.f32 %v13362, %v13650
  %v13652 = vpop.f32.mrb[0].mxu0
  %v13653 = vpop.f32.mrb[0].mxu0
  %v13654 = vadd.f32 %v13365, %v13653
  %v13655 = vpop.f32.mrb[0].mxu0
  %13656 = vmatprep.mubr.bf16.mxu0 %v13166
  %13657 = vmatmul.mubr.bf16.gmra.mrb[0].mxu0 %v12767
  %v13658 = vpop.f32.mrb[0].mxu0
  %v13659 = vadd.f32 %v13370, %v13658
  %v13660 = vpop.f32.mrb[0].mxu0
  %v13661 = vpop.f32.mrb[0].mxu0
  %v13662 = vadd.f32 %v13373, %v13661
  %v13663 = vpop.f32.mrb[0].mxu0
  %13664 = vmatprep.mubr.bf16.mxu0 %v13169
  %13665 = vmatmul.mubr.bf16.gmra.mrb[0].mxu0 %v12771
  %v13666 = vpop.f32.mrb[0].mxu0
  %v13667 = vadd.f32 %v13378, %v13666
  %v13668 = vpop.f32.mrb[0].mxu0
  %v13669 = vpop.f32.mrb[0].mxu0
  %v13670 = vadd.f32 %v13381, %v13669
  %v13671 = vpop.f32.mrb[0].mxu0
  %13672 = vmatprep.mubr.bf16.mxu0 %v13172
  %13673 = vmatmul.mubr.bf16.gmra.mrb[0].mxu0 %v12775
  %v13674 = vpop.f32.mrb[0].mxu0
  %v13675 = vadd.f32 %v13386, %v13674
  %v13676 = vpop.f32.mrb[0].mxu0
  %v13677 = vpop.f32.mrb[0].mxu0
  %v13678 = vadd.f32 %v13389, %v13677
  %v13679 = vpop.f32.mrb[0].mxu0
  %13680 = vmatprep.mubr.bf16.mxu0 %v13175
  %13681 = vmatmul.mubr.bf16.gmra.mrb[0].mxu0 %v12779
  %v13682 = vpop.f32.mrb[0].mxu0
  %v13683 = vadd.f32 %v13394, %v13682
  %v13684 = vpop.f32.mrb[0].mxu0
  %v13685 = vpop.f32.mrb[0].mxu0
  %v13686 = vadd.f32 %v13397, %v13685
  %v13687 = vpop.f32.mrb[0].mxu0
  %13688 = vmatprep.mubr.bf16.mxu0 %v13178
  %13689 = vmatmul.mubr.bf16.gmra.mrb[0].mxu0 %v12783
  %v13690 = vpop.f32.mrb[0].mxu0
  %v13691 = vadd.f32 %v13402, %v13690
  %v13692 = vpop.f32.mrb[0].mxu0
  %v13693 = vpop.f32.mrb[0].mxu0
  %v13694 = vadd.f32 %v13405, %v13693
  %v13695 = vpop.f32.mrb[0].mxu0
  %13696 = vmatprep.mubr.bf16.mxu0 %v13181
  %13697 = vmatmul.mubr.bf16.gmra.mrb[0].mxu0 %v12787
  %v13698 = vpop.f32.mrb[0].mxu0
  %v13699 = vadd.f32 %v13410, %v13698
  %v13700 = vpop.f32.mrb[0].mxu0
  %v13701 = vpop.f32.mrb[0].mxu0
  %v13702 = vadd.f32 %v13413, %v13701
  %v13703 = vpop.f32.mrb[0].mxu0
  %13704 = vmatprep.mubr.bf16.mxu0 %v13184
  %13705 = vmatmul.mubr.bf16.gmra.mrb[0].mxu0 %v12791
  %v13706 = vpop.f32.mrb[0].mxu0
  %v13707 = vadd.f32 %v13418, %v13706
  %v13708 = vpop.f32.mrb[0].mxu0
  %v13709 = vpop.f32.mrb[0].mxu0
  %v13710 = vadd.f32 %v13421, %v13709
  %v13711 = vpop.f32.mrb[0].mxu0
  %13712 = vmatprep.mubr.bf16.mxu0 %v13187
  %13713 = vmatmul.mubr.bf16.gmra.mrb[0].mxu0 %v12795
  %v13714 = vpop.f32.mrb[0].mxu0
  %v13715 = vadd.f32 %v13426, %v13714
  %v13716 = vpop.f32.mrb[0].mxu0
  %v13717 = vpop.f32.mrb[0].mxu0
  %v13718 = vadd.f32 %v13429, %v13717
  %v13719 = vpop.f32.mrb[0].mxu0
  %13720 = vmatprep.mubr.bf16.mxu0 %v13190
  %13721 = vmatmul.mubr.bf16.gmra.mrb[0].mxu0 %v12799
  %v13722 = vpop.f32.mrb[0].mxu0
  %v13723 = vadd.f32 %v13434, %v13722
  %v13724 = vpop.f32.mrb[0].mxu0
  %v13725 = vpop.f32.mrb[0].mxu0
  %v13726 = vadd.f32 %v13437, %v13725
  %v13727 = vpop.f32.mrb[0].mxu0
  %13728 = vmatprep.mubr.bf16.mxu0 %v13193
  %13729 = vmatmul.mubr.bf16.gmra.mrb[0].mxu0 %v12803
  %v13730 = vpop.f32.mrb[0].mxu0
  %v13731 = vadd.f32 %v13442, %v13730
  %v13732 = vpop.f32.mrb[0].mxu0
  %v13733 = vpop.f32.mrb[0].mxu0
  %v13734 = vadd.f32 %v13445, %v13733
  %v13735 = vpop.f32.mrb[0].mxu0
  %13736 = vmatprep.mubr.bf16.mxu0 %v13196
  %13737 = vmatmul.mubr.bf16.gmra.mrb[0].mxu0 %v12807
  %v13738 = vpop.f32.mrb[0].mxu0
  %v13739 = vadd.f32 %v13450, %v13738
  %v13740 = vpop.f32.mrb[0].mxu0
  %v13741 = vpop.f32.mrb[0].mxu0
  %v13742 = vadd.f32 %v13453, %v13741
  %v13743 = vpop.f32.mrb[0].mxu0
  %13744 = vmatprep.mubr.bf16.mxu0 %v13199
  %13745 = vmatmul.mubr.bf16.gmra.mrb[0].mxu0 %v12811
  %v13746 = vpop.f32.mrb[0].mxu0
  %v13747 = vadd.f32 %v13458, %v13746
  %v13748 = vpop.f32.mrb[0].mxu0
  %v13749 = vpop.f32.mrb[0].mxu0
  %v13750 = vadd.f32 %v13461, %v13749
  %v13751 = vpop.f32.mrb[0].mxu0
  %13752 = vmatprep.mubr.bf16.mxu0 %v13202
  %13753 = vmatmul.mubr.bf16.gmra.mrb[0].mxu0 %v12815
  %v13754 = vpop.f32.mrb[0].mxu0
  %v13755 = vadd.f32 %v13466, %v13754
  %v13756 = vpop.f32.mrb[0].mxu0
  %v13757 = vpop.f32.mrb[0].mxu0
  %v13758 = vadd.f32 %v13469, %v13757
  %v13759 = vpop.f32.mrb[0].mxu0
  %13760 = vmatprep.mubr.bf16.mxu0 %v13205
  %13761 = vmatmul.mubr.bf16.gmra.mrb[0].mxu0 %v12819
  %v13762 = vpop.f32.mrb[0].mxu0
  %v13763 = vadd.f32 %v13474, %v13762
  %v13764 = vpop.f32.mrb[0].mxu0
  %v13765 = vpop.f32.mrb[0].mxu0
  %v13766 = vadd.f32 %v13477, %v13765
  %v13767 = vpop.f32.mrb[0].mxu0
  %13768 = vmatprep.mubr.bf16.mxu0 %v13208
  %13769 = vmatmul.mubr.bf16.gmra.mrb[0].mxu0 %v12823
  %v13770 = vpop.f32.mrb[0].mxu0
  %v13771 = vadd.f32 %v13482, %v13770
  %v13772 = vpop.f32.mrb[0].mxu0
  %v13773 = vpop.f32.mrb[0].mxu0
  %v13774 = vadd.f32 %v13485, %v13773
  %v13775 = vpop.f32.mrb[0].mxu0
  %13776 = vmatprep.mubr.bf16.mxu0 %v13211
  %13777 = vmatmul.mubr.bf16.gmra.mrb[0].mxu0 %v12827
  %v13778 = vpop.f32.mrb[0].mxu0
  %v13779 = vadd.f32 %v13490, %v13778
  %v13780 = vpop.f32.mrb[0].mxu0
  %v13781 = vpop.f32.mrb[0].mxu0
  %v13782 = vadd.f32 %v13493, %v13781
  %v13783 = vpop.f32.mrb[0].mxu0
  %13784 = vmatprep.mubr.bf16.mxu0 %v13214
  %13785 = vmatmul.mubr.bf16.gmra.mrb[0].mxu0 %v12831
  %v13786 = vpop.f32.mrb[0].mxu0
  %v13787 = vadd.f32 %v13498, %v13786
  %v13788 = vpop.f32.mrb[0].mxu0
  %v13789 = vpop.f32.mrb[0].mxu0
  %v13790 = vadd.f32 %v13501, %v13789
  %v13791 = vpop.f32.mrb[0].mxu0
  %13792 = vmatprep.mubr.bf16.mxu0 %v13217
  %13793 = vmatmul.mubr.bf16.gmra.mrb[0].mxu0 %v12835
  %v13794 = vpop.f32.mrb[0].mxu0
  %v13795 = vadd.f32 %v13506, %v13794
  %v13796 = vpop.f32.mrb[0].mxu0
  %v13797 = vpop.f32.mrb[0].mxu0
  %v13798 = vadd.f32 %v13509, %v13797
  %v13799 = vpop.f32.mrb[0].mxu0
  %13800 = vdwg.mxu0
  %v13801 = vmax.f32 %v13547, 0.0
  %v13802 = vmax.f32 %v13550, 0.0
  %v13803 = vmax.f32 %v13555, 0.0
  %v13804 = vmax.f32 %v13558, 0.0
  %v13805 = vmax.f32 %v13563, 0.0
  %v13806 = vmax.f32 %v13566, 0.0
  %v13807 = vmax.f32 %v13571, 0.0
  %v13808 = vmax.f32 %v13574, 0.0
  %v13809 = vmax.f32 %v13579, 0.0
  %v13810 = vmax.f32 %v13582, 0.0
  %v13811 = vmax.f32 %v13587, 0.0
  %v13812 = vmax.f32 %v13590, 0.0
  %v13813 = vmax.f32 %v13595, 0.0
  %v13814 = vmax.f32 %v13598, 0.0
  %v13815 = vmax.f32 %v13603, 0.0
  %v13816 = vmax.f32 %v13606, 0.0
  %v13817 = vmax.f32 %v13611, 0.0
  %v13818 = vmax.f32 %v13614, 0.0
  %v13819 = vmax.f32 %v13619, 0.0
  %v13820 = vmax.f32 %v13622, 0.0
  %v13821 = vmax.f32 %v13627, 0.0
  %v13822 = vmax.f32 %v13630, 0.0
  %v13823 = vmax.f32 %v13635, 0.0
  %v13824 = vmax.f32 %v13638, 0.0
  %v13825 = vmax.f32 %v13643, 0.0
  %v13826 = vmax.f32 %v13646, 0.0
  %v13827 = vmax.f32 %v13651, 0.0
  %v13828 = vmax.f32 %v13654, 0.0
  %v13829 = vmax.f32 %v13659, 0.0
  %v13830 = vmax.f32 %v13662, 0.0
  %v13831 = vmax.f32 %v13667, 0.0
  %v13832 = vmax.f32 %v13670, 0.0
  %v13833 = vmax.f32 %v13675, 0.0
  %v13834 = vmax.f32 %v13678, 0.0
  %v13835 = vmax.f32 %v13683, 0.0
  %v13836 = vmax.f32 %v13686, 0.0
  %v13837 = vmax.f32 %v13691, 0.0
  %v13838 = vmax.f32 %v13694, 0.0
  %v13839 = vmax.f32 %v13699, 0.0
  %v13840 = vmax.f32 %v13702, 0.0
  %v13841 = vmax.f32 %v13707, 0.0
  %v13842 = vmax.f32 %v13710, 0.0
  %v13843 = vmax.f32 %v13715, 0.0
  %v13844 = vmax.f32 %v13718, 0.0
  %v13845 = vmax.f32 %v13723, 0.0
  %v13846 = vmax.f32 %v13726, 0.0
  %v13847 = vmax.f32 %v13731, 0.0
  %v13848 = vmax.f32 %v13734, 0.0
  %v13849 = vmax.f32 %v13739, 0.0
  %v13850 = vmax.f32 %v13742, 0.0
  %v13851 = vmax.f32 %v13747, 0.0
  %v13852 = vmax.f32 %v13750, 0.0
  %v13853 = vmax.f32 %v13755, 0.0
  %v13854 = vmax.f32 %v13758, 0.0
  %v13855 = vmax.f32 %v13763, 0.0
  %v13856 = vmax.f32 %v13766, 0.0
  %v13857 = vmax.f32 %v13771, 0.0
  %v13858 = vmax.f32 %v13774, 0.0
  %v13859 = vmax.f32 %v13779, 0.0
  %v13860 = vmax.f32 %v13782, 0.0
  %v13861 = vmax.f32 %v13787, 0.0
  %v13862 = vmax.f32 %v13790, 0.0
  %v13863 = vmax.f32 %v13795, 0.0
  %v13864 = vmax.f32 %v13798, 0.0
  %v13865 = vmax.f32 %v13801, %v13802
  %v13866 = vmax.f32 %v13803, %v13804
  %v13867 = vmax.f32 %v13805, %v13806
  %v13868 = vmax.f32 %v13807, %v13808
  %v13869 = vmax.f32 %v13809, %v13810
  %v13870 = vmax.f32 %v13811, %v13812
  %v13871 = vmax.f32 %v13813, %v13814
  %v13872 = vmax.f32 %v13815, %v13816
  %v13873 = vmax.f32 %v13817, %v13818
  %v13874 = vmax.f32 %v13819, %v13820
  %v13875 = vmax.f32 %v13821, %v13822
  %v13876 = vmax.f32 %v13823, %v13824
  %v13877 = vmax.f32 %v13825, %v13826
  %v13878 = vmax.f32 %v13827, %v13828
  %v13879 = vmax.f32 %v13829, %v13830
  %v13880 = vmax.f32 %v13831, %v13832
  %v13881 = vmax.f32 %v13833, %v13834
  %v13882 = vmax.f32 %v13835, %v13836
  %v13883 = vmax.f32 %v13837, %v13838
  %v13884 = vmax.f32 %v13839, %v13840
  %v13885 = vmax.f32 %v13841, %v13842
  %v13886 = vmax.f32 %v13843, %v13844
  %v13887 = vmax.f32 %v13845, %v13846
  %v13888 = vmax.f32 %v13847, %v13848
  %v13889 = vmax.f32 %v13849, %v13850
  %v13890 = vmax.f32 %v13851, %v13852
  %v13891 = vmax.f32 %v13853, %v13854
  %v13892 = vmax.f32 %v13855, %v13856
  %v13893 = vmax.f32 %v13857, %v13858
  %v13894 = vmax.f32 %v13859, %v13860
  %v13895 = vmax.f32 %v13861, %v13862
  %v13896 = vmax.f32 %v13863, %v13864
  %v13897 = vmax.f32 %v13865, %v13869
  %v13898 = vmax.f32 %v13866, %v13870
  %v13899 = vmax.f32 %v13867, %v13871
  %v13900 = vmax.f32 %v13868, %v13872
  %v13901 = vmax.f32 %v13873, %v13877
  %v13902 = vmax.f32 %v13874, %v13878
  %v13903 = vmax.f32 %v13875, %v13879
  %v13904 = vmax.f32 %v13876, %v13880
  %v13905 = vmax.f32 %v13881, %v13885
  %v13906 = vmax.f32 %v13882, %v13886
  %v13907 = vmax.f32 %v13883, %v13887
  %v13908 = vmax.f32 %v13884, %v13888
  %v13909 = vmax.f32 %v13889, %v13893
  %v13910 = vmax.f32 %v13890, %v13894
  %v13911 = vmax.f32 %v13891, %v13895
  %v13912 = vmax.f32 %v13892, %v13896
  %v13913 = vpack.c.bf16 %v13897, %v13897
  %v13914 = vpack.c.bf16 %v13898, %v13898
  %v13915 = vpack.c.bf16 %v13899, %v13899
  %v13916 = vpack.c.bf16 %v13900, %v13900
  %v13917 = vpack.c.bf16 %v13901, %v13901
  %v13918 = vpack.c.bf16 %v13902, %v13902
  %v13919 = vpack.c.bf16 %v13903, %v13903
  %v13920 = vpack.c.bf16 %v13904, %v13904
  %v13921 = vpack.c.bf16 %v13905, %v13905
  %v13922 = vpack.c.bf16 %v13906, %v13906
  %v13923 = vpack.c.bf16 %v13907, %v13907
  %v13924 = vpack.c.bf16 %v13908, %v13908
  %v13925 = vpack.c.bf16 %v13909, %v13909
  %v13926 = vpack.c.bf16 %v13910, %v13910
  %v13927 = vpack.c.bf16 %v13911, %v13911
  %v13928 = vpack.c.bf16 %v13912, %v13912
  %13930 = vrot.lane.b32.xlu0 %v13914, 50
  %v13931 = vpop.permute.xlu0 %13930
  %13933 = vrot.lane.b32.xlu0 %v13915, 100
  %v13934 = vpop.permute.xlu0 %13933
  %13936 = vrot.lane.b32.xlu0 %v13916, 22
  %v13937 = vpop.permute.xlu0 %13936
  %13939 = vrot.lane.b32.xlu0 %v13917, 72
  %v13940 = vpop.permute.xlu0 %13939
  %13942 = vrot.lane.b32.xlu0 %v13918, 122
  %v13943 = vpop.permute.xlu0 %13942
  %13945 = vrot.lane.b32.xlu0 %v13919, 44
  %v13946 = vpop.permute.xlu0 %13945
  %13948 = vrot.lane.b32.xlu0 %v13920, 94
  %v13949 = vpop.permute.xlu0 %13948
  %13951 = vrot.lane.b32.xlu0 %v13921, 16
  %v13952 = vpop.permute.xlu0 %13951
  %13954 = vrot.lane.b32.xlu0 %v13922, 66
  %v13955 = vpop.permute.xlu0 %13954
  %13957 = vrot.lane.b32.xlu0 %v13923, 116
  %v13958 = vpop.permute.xlu0 %13957
  %13960 = vrot.lane.b32.xlu0 %v13924, 38
  %v13961 = vpop.permute.xlu0 %13960
  %13963 = vrot.lane.b32.xlu0 %v13925, 88
  %v13964 = vpop.permute.xlu0 %13963
  %13966 = vrot.lane.b32.xlu0 %v13926, 10
  %v13967 = vpop.permute.xlu0 %13966
  %13969 = vrot.lane.b32.xlu0 %v13927, 60
  %v13970 = vpop.permute.xlu0 %13969
  %13972 = vrot.lane.b32.xlu0 %v13928, 110
  %v13973 = vpop.permute.xlu0 %13972
  %vm13974 = vcmask 408576
  %v13977 = vsel %vm13974, %v13913, %v13931
  %v13979 = vsel %vm9059, %v13977, %v13934
  %vm13981 = vcmask 179200
  %v13983 = vsel %vm13981, %v13934, %v13937
  %v13985 = vsel %vm9704, %v13983, %v13940
  %vm13986 = vcmask 998400
  %v13988 = vsel %vm13986, %v13985, %v13943
  %v13991 = vsel %vm10349, %v13943, %v13946
  %vm13992 = vcmask 769024
  %v13994 = vsel %vm13992, %v13991, %v13949
  %vm13996 = vcmask 130048
  %v13998 = vsel %vm13996, %v13949, %v13952
  %vm13999 = vcmask 539648
  %v14001 = vsel %vm13999, %v13998, %v13955
  %v14003 = vsel %vm13122, %v14001, %v13958
  %vm14005 = vcmask 310272
  %v14007 = vsel %vm14005, %v13958, %v13961
  %vm14008 = vcmask 719872
  %v14010 = vsel %vm14008, %v14007, %v13964
  %vm14012 = vcmask 80896
  %v14014 = vsel %vm14012, %v13964, %v13967
  %v14016 = vsel %vm8801, %v14014, %v13970
  %vm14017 = vcmask 900096
  %v14019 = vsel %vm14017, %v14016, %v13973
  %v14021 = vld [vmem:[%s5] sm:$0xff]
  %v14022 = vld [vmem:[%s5 + $0x8] sm:$0xff]
  %v14023 = vld [vmem:[%s5 + $0x10] sm:$0xff]
  %v14024 = vld [vmem:[%s5 + $0x18] sm:$0xff]
  %v14025 = vld [vmem:[%s5 + $0x20] sm:$0xff]
  %v14026 = vld [vmem:[%s5 + $0x28] sm:$0xff]
  %v14027 = vld [vmem:[%s5 + $0x30] sm:$0xff]
  %v14028 = vld [vmem:[%s5 + $0x38] sm:$0xff]
  %v14029 = vld [vmem:[%s5 + $0x40] sm:$0xff]
  %v14030 = vld [vmem:[%s5 + $0x48] sm:$0xff]
  %v14031 = vld [vmem:[%s5 + $0x50] sm:$0xff]
  %v14032 = vld [vmem:[%s5 + $0x58] sm:$0xff]
  %v14033 = vld [vmem:[%s5 + $0x60] sm:$0xff]
  %v14034 = vld [vmem:[%s5 + $0x68] sm:$0xff]
  %v14035 = vld [vmem:[%s5 + $0x70] sm:$0xff]
  %v14036 = vld [vmem:[%s5 + $0x78] sm:$0xff]
  %v14037 = vld [vmem:[%s5 + $0x80] sm:$0xff]
  %v14038 = vld [vmem:[%s5 + $0x88] sm:$0xff]
  %v14039 = vld [vmem:[%s5 + $0x90] sm:$0xff]
  %v14040 = vld [vmem:[%s5 + $0x98] sm:$0xff]
  %v14041 = vld [vmem:[%s5 + $0xa0] sm:$0xff]
  %v14042 = vld [vmem:[%s5 + $0xa8] sm:$0xff]
  %v14043 = vld [vmem:[%s5 + $0xb0] sm:$0xff]
  %v14044 = vld [vmem:[%s5 + $0xb8] sm:$0xff]
  %v14045 = vld [vmem:[%s5 + $0xc0] sm:$0xff]
  %v14046 = vld [vmem:[%s5 + $0xc8] sm:$0xff]
  %v14047 = vld [vmem:[%s5 + $0xd0] sm:$0xff]
  %v14048 = vld [vmem:[%s5 + $0xd8] sm:$0xff]
  %v14049 = vld [vmem:[%s5 + $0xe0] sm:$0xff]
  %v14050 = vld [vmem:[%s5 + $0xe8] sm:$0xff]
  %v14051 = vld [vmem:[%s5 + $0xf0] sm:$0xff]
  %v14052 = vld [vmem:[%s5 + $0xf8] sm:$0xff]
  %v14053 = vld [vmem:[%s5 + $0x100] sm:$0xff]
  %v14054 = vld [vmem:[%s5 + $0x108] sm:$0xff]
  %v14055 = vld [vmem:[%s5 + $0x110] sm:$0xff]
  %v14056 = vld [vmem:[%s5 + $0x118] sm:$0xff]
  %v14057 = vld [vmem:[%s5 + $0x120] sm:$0xff]
  %v14058 = vld [vmem:[%s5 + $0x128] sm:$0xff]
  %v14059 = vld [vmem:[%s5 + $0x130] sm:$0xff]
  %v14060 = vld [vmem:[%s5 + $0x138] sm:$0xff]
  %v14061 = vld [vmem:[%s5 + $0x140] sm:$0xff]
  %v14062 = vld [vmem:[%s5 + $0x148] sm:$0xff]
  %v14063 = vld [vmem:[%s5 + $0x150] sm:$0xff]
  %v14064 = vld [vmem:[%s5 + $0x158] sm:$0xff]
  %v14065 = vld [vmem:[%s5 + $0x160] sm:$0xff]
  %v14066 = vld [vmem:[%s5 + $0x168] sm:$0xff]
  %v14067 = vld [vmem:[%s5 + $0x170] sm:$0xff]
  %v14068 = vld [vmem:[%s5 + $0x178] sm:$0xff]
  %v14069 = vld [vmem:[%s5 + $0x180] sm:$0xff]
  %v14070 = vld [vmem:[%s5 + $0x188] sm:$0xff]
  %v14071 = vld [vmem:[%s5 + $0x190] sm:$0xff]
  %v14072 = vld [vmem:[%s5 + $0x198] sm:$0xff]
  %v14073 = vld [vmem:[%s5 + $0x1a0] sm:$0xff]
  %v14074 = vld [vmem:[%s5 + $0x1a8] sm:$0xff]
  %v14075 = vld [vmem:[%s5 + $0x1b0] sm:$0xff]
  %v14076 = vld [vmem:[%s5 + $0x1b8] sm:$0xff]
  %v14077 = vld [vmem:[%s5 + $0x1c0] sm:$0xff]
  %v14078 = vld [vmem:[%s5 + $0x1c8] sm:$0xff]
  %v14079 = vld [vmem:[%s5 + $0x1d0] sm:$0xff]
  %v14080 = vld [vmem:[%s5 + $0x1d8] sm:$0xff]
  %v14081 = vld [vmem:[%s5 + $0x1e0] sm:$0xff]
  %v14082 = vld [vmem:[%s5 + $0x1e8] sm:$0xff]
  %v14083 = vld [vmem:[%s5 + $0x1f0] sm:$0xff]
  %v14084 = vld [vmem:[%s5 + $0x1f8] sm:$0xff]
  %v14085 = vld [vmem:[%s5 + $0x200] sm:$0xff]
  %v14086 = vld [vmem:[%s5 + $0x208] sm:$0xff]
  %v14087 = vld [vmem:[%s5 + $0x210] sm:$0xff]
  %v14088 = vld [vmem:[%s5 + $0x218] sm:$0xff]
  %v14089 = vld [vmem:[%s5 + $0x220] sm:$0xff]
  %v14090 = vld [vmem:[%s5 + $0x228] sm:$0xff]
  %v14091 = vld [vmem:[%s5 + $0x230] sm:$0xff]
  %v14092 = vld [vmem:[%s5 + $0x238] sm:$0xff]
  %v14093 = vld [vmem:[%s5 + $0x240] sm:$0xff]
  %v14094 = vld [vmem:[%s5 + $0x248] sm:$0xff]
  %v14095 = vld [vmem:[%s5 + $0x250] sm:$0xff]
  %v14096 = vld [vmem:[%s5 + $0x258] sm:$0xff]
  %v14097 = vld [vmem:[%s5 + $0x260] sm:$0xff]
  %v14098 = vld [vmem:[%s5 + $0x268] sm:$0xff]
  %v14099 = vld [vmem:[%s5 + $0x270] sm:$0xff]
  %v14100 = vld [vmem:[%s5 + $0x278] sm:$0xff]
  %v14101 = vld [vmem:[%s5 + $0x280] sm:$0xff]
  %v14102 = vld [vmem:[%s5 + $0x288] sm:$0xff]
  %v14103 = vld [vmem:[%s5 + $0x290] sm:$0xff]
  %v14104 = vld [vmem:[%s5 + $0x298] sm:$0xff]
  %v14105 = vld [vmem:[%s5 + $0x2a0] sm:$0xff]
  %v14106 = vld [vmem:[%s5 + $0x2a8] sm:$0xff]
  %v14107 = vld [vmem:[%s5 + $0x2b0] sm:$0xff]
  %v14108 = vld [vmem:[%s5 + $0x2b8] sm:$0xff]
  %v14109 = vld [vmem:[%s5 + $0x2c0] sm:$0xff]
  %v14110 = vld [vmem:[%s5 + $0x2c8] sm:$0xff]
  %v14111 = vld [vmem:[%s5 + $0x2d0] sm:$0xff]
  %v14112 = vld [vmem:[%s5 + $0x2d8] sm:$0xff]
  %v14113 = vld [vmem:[%s5 + $0x2e0] sm:$0xff]
  %v14114 = vld [vmem:[%s5 + $0x2e8] sm:$0xff]
  %v14115 = vld [vmem:[%s5 + $0x2f0] sm:$0xff]
  %v14116 = vld [vmem:[%s5 + $0x2f8] sm:$0xff]
  %v14117 = vld [vmem:[%s5 + $0x300] sm:$0xff]
  %v14118 = vld [vmem:[%s5 + $0x308] sm:$0xff]
  %v14119 = vld [vmem:[%s5 + $0x310] sm:$0xff]
  %v14120 = vld [vmem:[%s5 + $0x318] sm:$0xff]
  %v14121 = vld [vmem:[%s5 + $0x320] sm:$0xff]
  %v14122 = vld [vmem:[%s5 + $0x328] sm:$0xff]
  %v14123 = vld [vmem:[%s5 + $0x330] sm:$0xff]
  %v14124 = vld [vmem:[%s5 + $0x338] sm:$0xff]
  %v14125 = vld [vmem:[%s5 + $0x340] sm:$0xff]
  %v14126 = vld [vmem:[%s5 + $0x348] sm:$0xff]
  %v14127 = vld [vmem:[%s5 + $0x350] sm:$0xff]
  %v14128 = vld [vmem:[%s5 + $0x358] sm:$0xff]
  %v14129 = vld [vmem:[%s5 + $0x360] sm:$0xff]
  %v14130 = vld [vmem:[%s5 + $0x368] sm:$0xff]
  %v14131 = vld [vmem:[%s5 + $0x370] sm:$0xff]
  %v14132 = vld [vmem:[%s5 + $0x378] sm:$0xff]
  %v14133 = vld [vmem:[%s5 + $0x380] sm:$0xff]
  %v14134 = vld [vmem:[%s5 + $0x388] sm:$0xff]
  %v14135 = vld [vmem:[%s5 + $0x390] sm:$0xff]
  %v14136 = vld [vmem:[%s5 + $0x398] sm:$0xff]
  %v14137 = vld [vmem:[%s5 + $0x3a0] sm:$0xff]
  %v14138 = vld [vmem:[%s5 + $0x3a8] sm:$0xff]
  %v14139 = vld [vmem:[%s5 + $0x3b0] sm:$0xff]
  %v14140 = vld [vmem:[%s5 + $0x3b8] sm:$0xff]
  %v14141 = vld [vmem:[%s5 + $0x3c0] sm:$0xff]
  %v14142 = vld [vmem:[%s5 + $0x3c8] sm:$0xff]
  %v14143 = vld [vmem:[%s5 + $0x3d0] sm:$0xff]
  %v14144 = vld [vmem:[%s5 + $0x3d8] sm:$0xff]
  %v14145 = vld [vmem:[%s5 + $0x3e0] sm:$0xff]
  %v14146 = vld [vmem:[%s5 + $0x3e8] sm:$0xff]
  %v14147 = vld [vmem:[%s5 + $0x3f0] sm:$0xff]
  %v14148 = vld [vmem:[%s5 + $0x3f8] sm:$0xff]
  %v14149 = vld [vmem:[%s5 + $0x400] sm:$0xff]
  %v14150 = vld [vmem:[%s5 + $0x408] sm:$0xff]
  %v14151 = vld [vmem:[%s5 + $0x410] sm:$0xff]
  %v14152 = vld [vmem:[%s5 + $0x418] sm:$0xff]
  %v14153 = vld [vmem:[%s5 + $0x420] sm:$0xff]
  %v14154 = vld [vmem:[%s5 + $0x428] sm:$0xff]
  %v14155 = vld [vmem:[%s5 + $0x430] sm:$0xff]
  %v14156 = vld [vmem:[%s5 + $0x438] sm:$0xff]
  %v14157 = vld [vmem:[%s5 + $0x440] sm:$0xff]
  %v14158 = vld [vmem:[%s5 + $0x448] sm:$0xff]
  %v14159 = vld [vmem:[%s5 + $0x450] sm:$0xff]
  %v14160 = vld [vmem:[%s5 + $0x458] sm:$0xff]
  %v14161 = vld [vmem:[%s5 + $0x460] sm:$0xff]
  %v14162 = vld [vmem:[%s5 + $0x468] sm:$0xff]
  %v14163 = vld [vmem:[%s5 + $0x470] sm:$0xff]
  %v14164 = vld [vmem:[%s5 + $0x478] sm:$0xff]
  %v14165 = vld [vmem:[%s5 + $0x480] sm:$0xff]
  %v14166 = vld [vmem:[%s5 + $0x488] sm:$0xff]
  %v14167 = vld [vmem:[%s5 + $0x490] sm:$0xff]
  %v14168 = vld [vmem:[%s5 + $0x498] sm:$0xff]
  %v14169 = vld [vmem:[%s5 + $0x4a0] sm:$0xff]
  %v14170 = vld [vmem:[%s5 + $0x4a8] sm:$0xff]
  %v14171 = vld [vmem:[%s5 + $0x4b0] sm:$0xff]
  %v14172 = vld [vmem:[%s5 + $0x4b8] sm:$0xff]
  %v14173 = vld [vmem:[%s5 + $0x4c0] sm:$0xff]
  %v14174 = vld [vmem:[%s5 + $0x4c8] sm:$0xff]
  %v14175 = vld [vmem:[%s5 + $0x4d0] sm:$0xff]
  %v14176 = vld [vmem:[%s5 + $0x4d8] sm:$0xff]
  %v14177 = vld [vmem:[%s5 + $0x4e0] sm:$0xff]
  %v14178 = vld [vmem:[%s5 + $0x4e8] sm:$0xff]
  %v14179 = vld [vmem:[%s5 + $0x4f0] sm:$0xff]
  %v14180 = vld [vmem:[%s5 + $0x4f8] sm:$0xff]
  %v14181 = vld [vmem:[%s5 + $0x500] sm:$0xff]
  %v14182 = vld [vmem:[%s5 + $0x508] sm:$0xff]
  %v14183 = vld [vmem:[%s5 + $0x510] sm:$0xff]
  %v14184 = vld [vmem:[%s5 + $0x518] sm:$0xff]
  %v14185 = vld [vmem:[%s5 + $0x520] sm:$0xff]
  %v14186 = vld [vmem:[%s5 + $0x528] sm:$0xff]
  %v14187 = vld [vmem:[%s5 + $0x530] sm:$0xff]
  %v14188 = vld [vmem:[%s5 + $0x538] sm:$0xff]
  %v14189 = vld [vmem:[%s5 + $0x540] sm:$0xff]
  %v14190 = vld [vmem:[%s5 + $0x548] sm:$0xff]
  %v14191 = vld [vmem:[%s5 + $0x550] sm:$0xff]
  %v14192 = vld [vmem:[%s5 + $0x558] sm:$0xff]
  %v14193 = vld [vmem:[%s5 + $0x560] sm:$0xff]
  %v14194 = vld [vmem:[%s5 + $0x568] sm:$0xff]
  %v14195 = vld [vmem:[%s5 + $0x570] sm:$0xff]
  %v14196 = vld [vmem:[%s5 + $0x578] sm:$0xff]
  %v14197 = vld [vmem:[%s5 + $0x580] sm:$0xff]
  %v14198 = vld [vmem:[%s5 + $0x588] sm:$0xff]
  %v14199 = vld [vmem:[%s5 + $0x590] sm:$0xff]
  %v14200 = vld [vmem:[%s5 + $0x598] sm:$0xff]
  %v14201 = vld [vmem:[%s5 + $0x5a0] sm:$0xff]
  %v14202 = vld [vmem:[%s5 + $0x5a8] sm:$0xff]
  %v14203 = vld [vmem:[%s5 + $0x5b0] sm:$0xff]
  %v14204 = vld [vmem:[%s5 + $0x5b8] sm:$0xff]
  %v14205 = vld [vmem:[%s5 + $0x5c0] sm:$0xff]
  %v14206 = vld [vmem:[%s5 + $0x5c8] sm:$0xff]
  %v14207 = vld [vmem:[%s5 + $0x5d0] sm:$0xff]
  %v14208 = vld [vmem:[%s5 + $0x5d8] sm:$0xff]
  %v14209 = vld [vmem:[%s5 + $0x5e0] sm:$0xff]
  %v14210 = vld [vmem:[%s5 + $0x5e8] sm:$0xff]
  %v14211 = vld [vmem:[%s5 + $0x5f0] sm:$0xff]
  %v14212 = vld [vmem:[%s5 + $0x5f8] sm:$0xff]
  %v14213 = vld [vmem:[%s5 + $0x600] sm:$0xff]
  %v14214 = vld [vmem:[%s5 + $0x608] sm:$0xff]
  %v14215 = vld [vmem:[%s5 + $0x610] sm:$0xff]
  %v14216 = vld [vmem:[%s5 + $0x618] sm:$0xff]
  %v14217 = vld [vmem:[%s5 + $0x620] sm:$0xff]
  %v14218 = vld [vmem:[%s5 + $0x628] sm:$0xff]
  %v14219 = vld [vmem:[%s5 + $0x630] sm:$0xff]
  %v14220 = vld [vmem:[%s5 + $0x638] sm:$0xff]
  %v14221 = vld [vmem:[%s6] sm:$0xf]
  %v14223 = vlaneseq
  %v14224 = vshrl.u32 %v14223, 7
  %v14225 = vsub.s32 0, %v14224
  %v14226 = vrot.slane %v14221, %v14225
  %v14227 = vlaneseq
  %v14228 = vshrl.u32 %v14227, 7
  %v14229 = vsub.s32 1, %v14228
  %v14230 = vrot.slane %v14221, %v14229
  %v14231 = vlaneseq
  %v14232 = vshrl.u32 %v14231, 7
  %v14233 = vsub.s32 2, %v14232
  %v14234 = vrot.slane %v14221, %v14233
  %v14235 = vlaneseq
  %v14236 = vshrl.u32 %v14235, 7
  %v14237 = vsub.s32 3, %v14236
  %v14238 = vrot.slane %v14221, %v14237
  %v14443 = vunpack.c.l.b16 %v14021
  %v14444 = vunpack.c.h.b16 %v14021
  %v14445 = vunpack.c.l.b16 %v14022
  %v14446 = vunpack.c.h.b16 %v14022
  %v14447 = vunpack.c.l.b16 %v14023
  %v14448 = vunpack.c.h.b16 %v14023
  %v14449 = vunpack.c.l.b16 %v14024
  %v14450 = vunpack.c.h.b16 %v14024
  %v14451 = vunpack.c.l.b16 %v14025
  %v14452 = vunpack.c.h.b16 %v14025
  %v14453 = vunpack.c.l.b16 %v14026
  %v14454 = vunpack.c.h.b16 %v14026
  %v14455 = vunpack.c.l.b16 %v14027
  %v14456 = vunpack.c.h.b16 %v14027
  %v14457 = vunpack.c.l.b16 %v14028
  %v14458 = vunpack.c.h.b16 %v14028
  %v14459 = vunpack.c.l.b16 %v14029
  %v14460 = vunpack.c.h.b16 %v14029
  %v14461 = vunpack.c.l.b16 %v14030
  %v14462 = vunpack.c.h.b16 %v14030
  %v14463 = vunpack.c.l.b16 %v14031
  %v14464 = vunpack.c.h.b16 %v14031
  %v14465 = vunpack.c.l.b16 %v14032
  %v14466 = vunpack.c.h.b16 %v14032
  %v14467 = vunpack.c.l.b16 %v14033
  %v14468 = vunpack.c.h.b16 %v14033
  %v14469 = vunpack.c.l.b16 %v14034
  %v14470 = vunpack.c.h.b16 %v14034
  %v14471 = vunpack.c.l.b16 %v14035
  %v14472 = vunpack.c.h.b16 %v14035
  %v14473 = vunpack.c.l.b16 %v14036
  %v14474 = vunpack.c.h.b16 %v14036
  %v14475 = vunpack.c.l.b16 %v14037
  %v14476 = vunpack.c.h.b16 %v14037
  %v14477 = vunpack.c.l.b16 %v14038
  %v14478 = vunpack.c.h.b16 %v14038
  %v14479 = vunpack.c.l.b16 %v14039
  %v14480 = vunpack.c.h.b16 %v14039
  %v14481 = vunpack.c.l.b16 %v14040
  %v14482 = vunpack.c.h.b16 %v14040
  %v14483 = vunpack.c.l.b16 %v14041
  %v14484 = vunpack.c.h.b16 %v14041
  %v14485 = vunpack.c.l.b16 %v14042
  %v14486 = vunpack.c.h.b16 %v14042
  %v14487 = vunpack.c.l.b16 %v14043
  %v14488 = vunpack.c.h.b16 %v14043
  %v14489 = vunpack.c.l.b16 %v14044
  %v14490 = vunpack.c.h.b16 %v14044
  %v14491 = vunpack.c.l.b16 %v14045
  %v14492 = vunpack.c.h.b16 %v14045
  %v14493 = vunpack.c.l.b16 %v14046
  %v14494 = vunpack.c.h.b16 %v14046
  %v14495 = vunpack.c.l.b16 %v14047
  %v14496 = vunpack.c.h.b16 %v14047
  %v14497 = vunpack.c.l.b16 %v14048
  %v14498 = vunpack.c.h.b16 %v14048
  %v14499 = vunpack.c.l.b16 %v14049
  %v14500 = vunpack.c.h.b16 %v14049
  %v14501 = vunpack.c.l.b16 %v14050
  %v14502 = vunpack.c.h.b16 %v14050
  %v14503 = vunpack.c.l.b16 %v14051
  %v14504 = vunpack.c.h.b16 %v14051
  %v14505 = vunpack.c.l.b16 %v14052
  %v14506 = vunpack.c.h.b16 %v14052
  %v14507 = vunpack.c.l.b16 %v14053
  %v14508 = vunpack.c.h.b16 %v14053
  %v14509 = vunpack.c.l.b16 %v14054
  %v14510 = vunpack.c.h.b16 %v14054
  %v14511 = vunpack.c.l.b16 %v14055
  %v14512 = vunpack.c.h.b16 %v14055
  %v14513 = vunpack.c.l.b16 %v14056
  %v14514 = vunpack.c.h.b16 %v14056
  %v14515 = vunpack.c.l.b16 %v14057
  %v14516 = vunpack.c.h.b16 %v14057
  %v14517 = vunpack.c.l.b16 %v14058
  %v14518 = vunpack.c.h.b16 %v14058
  %v14519 = vunpack.c.l.b16 %v14059
  %v14520 = vunpack.c.h.b16 %v14059
  %v14521 = vunpack.c.l.b16 %v14060
  %v14522 = vunpack.c.h.b16 %v14060
  %v14523 = vunpack.c.l.b16 %v14061
  %v14524 = vunpack.c.h.b16 %v14061
  %v14525 = vunpack.c.l.b16 %v14062
  %v14526 = vunpack.c.h.b16 %v14062
  %v14527 = vunpack.c.l.b16 %v14063
  %v14528 = vunpack.c.h.b16 %v14063
  %v14529 = vunpack.c.l.b16 %v14064
  %v14530 = vunpack.c.h.b16 %v14064
  %v14531 = vunpack.c.l.b16 %v14065
  %v14532 = vunpack.c.h.b16 %v14065
  %v14533 = vunpack.c.l.b16 %v14066
  %v14534 = vunpack.c.h.b16 %v14066
  %v14535 = vunpack.c.l.b16 %v14067
  %v14536 = vunpack.c.h.b16 %v14067
  %v14537 = vunpack.c.l.b16 %v14068
  %v14538 = vunpack.c.h.b16 %v14068
  %v14539 = vunpack.c.l.b16 %v14069
  %v14540 = vunpack.c.h.b16 %v14069
  %v14541 = vunpack.c.l.b16 %v14070
  %v14542 = vunpack.c.h.b16 %v14070
  %v14543 = vunpack.c.l.b16 %v14071
  %v14544 = vunpack.c.h.b16 %v14071
  %v14545 = vunpack.c.l.b16 %v14072
  %v14546 = vunpack.c.h.b16 %v14072
  %v14547 = vunpack.c.l.b16 %v14073
  %v14548 = vunpack.c.h.b16 %v14073
  %v14549 = vunpack.c.l.b16 %v14074
  %v14550 = vunpack.c.h.b16 %v14074
  %v14551 = vunpack.c.l.b16 %v14075
  %v14552 = vunpack.c.h.b16 %v14075
  %v14553 = vunpack.c.l.b16 %v14076
  %v14554 = vunpack.c.h.b16 %v14076
  %v14555 = vunpack.c.l.b16 %v14077
  %v14556 = vunpack.c.h.b16 %v14077
  %v14557 = vunpack.c.l.b16 %v14078
  %v14558 = vunpack.c.h.b16 %v14078
  %v14559 = vunpack.c.l.b16 %v14079
  %v14560 = vunpack.c.h.b16 %v14079
  %v14561 = vunpack.c.l.b16 %v14080
  %v14562 = vunpack.c.h.b16 %v14080
  %v14563 = vunpack.c.l.b16 %v14081
  %v14564 = vunpack.c.h.b16 %v14081
  %v14565 = vunpack.c.l.b16 %v14082
  %v14566 = vunpack.c.h.b16 %v14082
  %v14567 = vunpack.c.l.b16 %v14083
  %v14568 = vunpack.c.h.b16 %v14083
  %v14569 = vunpack.c.l.b16 %v14084
  %v14570 = vunpack.c.h.b16 %v14084
  %v14571 = vunpack.c.l.b16 %v14085
  %v14572 = vunpack.c.h.b16 %v14085
  %v14573 = vunpack.c.l.b16 %v14086
  %v14574 = vunpack.c.h.b16 %v14086
  %v14575 = vunpack.c.l.b16 %v14087
  %v14576 = vunpack.c.h.b16 %v14087
  %v14577 = vunpack.c.l.b16 %v14088
  %v14578 = vunpack.c.h.b16 %v14088
  %v14579 = vunpack.c.l.b16 %v14089
  %v14580 = vunpack.c.h.b16 %v14089
  %v14581 = vunpack.c.l.b16 %v14090
  %v14582 = vunpack.c.h.b16 %v14090
  %v14583 = vunpack.c.l.b16 %v14091
  %v14584 = vunpack.c.h.b16 %v14091
  %v14585 = vunpack.c.l.b16 %v14092
  %v14586 = vunpack.c.h.b16 %v14092
  %v14587 = vunpack.c.l.b16 %v14093
  %v14588 = vunpack.c.h.b16 %v14093
  %v14589 = vunpack.c.l.b16 %v14094
  %v14590 = vunpack.c.h.b16 %v14094
  %v14591 = vunpack.c.l.b16 %v14095
  %v14592 = vunpack.c.h.b16 %v14095
  %v14593 = vunpack.c.l.b16 %v14096
  %v14594 = vunpack.c.h.b16 %v14096
  %v14595 = vunpack.c.l.b16 %v14097
  %v14596 = vunpack.c.h.b16 %v14097
  %v14597 = vunpack.c.l.b16 %v14098
  %v14598 = vunpack.c.h.b16 %v14098
  %v14599 = vunpack.c.l.b16 %v14099
  %v14600 = vunpack.c.h.b16 %v14099
  %v14601 = vunpack.c.l.b16 %v14100
  %v14602 = vunpack.c.h.b16 %v14100
  %v14603 = vunpack.c.l.b16 %v14101
  %v14604 = vunpack.c.h.b16 %v14101
  %v14605 = vunpack.c.l.b16 %v14102
  %v14606 = vunpack.c.h.b16 %v14102
  %v14607 = vunpack.c.l.b16 %v14103
  %v14608 = vunpack.c.h.b16 %v14103
  %v14609 = vunpack.c.l.b16 %v14104
  %v14610 = vunpack.c.h.b16 %v14104
  %v14611 = vunpack.c.l.b16 %v14105
  %v14612 = vunpack.c.h.b16 %v14105
  %v14613 = vunpack.c.l.b16 %v14106
  %v14614 = vunpack.c.h.b16 %v14106
  %v14615 = vunpack.c.l.b16 %v14107
  %v14616 = vunpack.c.h.b16 %v14107
  %v14617 = vunpack.c.l.b16 %v14108
  %v14618 = vunpack.c.h.b16 %v14108
  %v14619 = vunpack.c.l.b16 %v14109
  %v14620 = vunpack.c.h.b16 %v14109
  %v14621 = vunpack.c.l.b16 %v14110
  %v14622 = vunpack.c.h.b16 %v14110
  %v14623 = vunpack.c.l.b16 %v14111
  %v14624 = vunpack.c.h.b16 %v14111
  %v14625 = vunpack.c.l.b16 %v14112
  %v14626 = vunpack.c.h.b16 %v14112
  %v14627 = vunpack.c.l.b16 %v14113
  %v14628 = vunpack.c.h.b16 %v14113
  %v14629 = vunpack.c.l.b16 %v14114
  %v14630 = vunpack.c.h.b16 %v14114
  %v14631 = vunpack.c.l.b16 %v14115
  %v14632 = vunpack.c.h.b16 %v14115
  %v14633 = vunpack.c.l.b16 %v14116
  %v14634 = vunpack.c.h.b16 %v14116
  %v14635 = vunpack.c.l.b16 %v14117
  %v14636 = vunpack.c.h.b16 %v14117
  %v14637 = vunpack.c.l.b16 %v14118
  %v14638 = vunpack.c.h.b16 %v14118
  %v14639 = vunpack.c.l.b16 %v14119
  %v14640 = vunpack.c.h.b16 %v14119
  %v14641 = vunpack.c.l.b16 %v14120
  %v14642 = vunpack.c.h.b16 %v14120
  %v14643 = vunpack.c.l.b16 %v14121
  %v14644 = vunpack.c.h.b16 %v14121
  %v14645 = vunpack.c.l.b16 %v14122
  %v14646 = vunpack.c.h.b16 %v14122
  %v14647 = vunpack.c.l.b16 %v14123
  %v14648 = vunpack.c.h.b16 %v14123
  %v14649 = vunpack.c.l.b16 %v14124
  %v14650 = vunpack.c.h.b16 %v14124
  %v14651 = vunpack.c.l.b16 %v14125
  %v14652 = vunpack.c.h.b16 %v14125
  %v14653 = vunpack.c.l.b16 %v14126
  %v14654 = vunpack.c.h.b16 %v14126
  %v14655 = vunpack.c.l.b16 %v14127
  %v14656 = vunpack.c.h.b16 %v14127
  %v14657 = vunpack.c.l.b16 %v14128
  %v14658 = vunpack.c.h.b16 %v14128
  %v14659 = vunpack.c.l.b16 %v14129
  %v14660 = vunpack.c.h.b16 %v14129
  %v14661 = vunpack.c.l.b16 %v14130
  %v14662 = vunpack.c.h.b16 %v14130
  %v14663 = vunpack.c.l.b16 %v14131
  %v14664 = vunpack.c.h.b16 %v14131
  %v14665 = vunpack.c.l.b16 %v14132
  %v14666 = vunpack.c.h.b16 %v14132
  %v14667 = vunpack.c.l.b16 %v14133
  %v14668 = vunpack.c.h.b16 %v14133
  %v14669 = vunpack.c.l.b16 %v14134
  %v14670 = vunpack.c.h.b16 %v14134
  %v14671 = vunpack.c.l.b16 %v14135
  %v14672 = vunpack.c.h.b16 %v14135
  %v14673 = vunpack.c.l.b16 %v14136
  %v14674 = vunpack.c.h.b16 %v14136
  %v14675 = vunpack.c.l.b16 %v14137
  %v14676 = vunpack.c.h.b16 %v14137
  %v14677 = vunpack.c.l.b16 %v14138
  %v14678 = vunpack.c.h.b16 %v14138
  %v14679 = vunpack.c.l.b16 %v14139
  %v14680 = vunpack.c.h.b16 %v14139
  %v14681 = vunpack.c.l.b16 %v14140
  %v14682 = vunpack.c.h.b16 %v14140
  %v14683 = vunpack.c.l.b16 %v14141
  %v14684 = vunpack.c.h.b16 %v14141
  %v14685 = vunpack.c.l.b16 %v14142
  %v14686 = vunpack.c.h.b16 %v14142
  %v14687 = vunpack.c.l.b16 %v14143
  %v14688 = vunpack.c.h.b16 %v14143
  %v14689 = vunpack.c.l.b16 %v14144
  %v14690 = vunpack.c.h.b16 %v14144
  %v14691 = vunpack.c.l.b16 %v14145
  %v14692 = vunpack.c.h.b16 %v14145
  %v14693 = vunpack.c.l.b16 %v14146
  %v14694 = vunpack.c.h.b16 %v14146
  %v14695 = vunpack.c.l.b16 %v14147
  %v14696 = vunpack.c.h.b16 %v14147
  %v14697 = vunpack.c.l.b16 %v14148
  %v14698 = vunpack.c.h.b16 %v14148
  %v14699 = vunpack.c.l.b16 %v14149
  %v14700 = vunpack.c.h.b16 %v14149
  %v14701 = vunpack.c.l.b16 %v14150
  %v14702 = vunpack.c.h.b16 %v14150
  %v14703 = vunpack.c.l.b16 %v14151
  %v14704 = vunpack.c.h.b16 %v14151
  %v14705 = vunpack.c.l.b16 %v14152
  %v14706 = vunpack.c.h.b16 %v14152
  %v14707 = vunpack.c.l.b16 %v14153
  %v14708 = vunpack.c.h.b16 %v14153
  %v14709 = vunpack.c.l.b16 %v14154
  %v14710 = vunpack.c.h.b16 %v14154
  %v14711 = vunpack.c.l.b16 %v14155
  %v14712 = vunpack.c.h.b16 %v14155
  %v14713 = vunpack.c.l.b16 %v14156
  %v14714 = vunpack.c.h.b16 %v14156
  %v14715 = vunpack.c.l.b16 %v14157
  %v14716 = vunpack.c.h.b16 %v14157
  %v14717 = vunpack.c.l.b16 %v14158
  %v14718 = vunpack.c.h.b16 %v14158
  %v14719 = vunpack.c.l.b16 %v14159
  %v14720 = vunpack.c.h.b16 %v14159
  %v14721 = vunpack.c.l.b16 %v14160
  %v14722 = vunpack.c.h.b16 %v14160
  %v14723 = vunpack.c.l.b16 %v14161
  %v14724 = vunpack.c.h.b16 %v14161
  %v14725 = vunpack.c.l.b16 %v14162
  %v14726 = vunpack.c.h.b16 %v14162
  %v14727 = vunpack.c.l.b16 %v14163
  %v14728 = vunpack.c.h.b16 %v14163
  %v14729 = vunpack.c.l.b16 %v14164
  %v14730 = vunpack.c.h.b16 %v14164
  %v14731 = vunpack.c.l.b16 %v14165
  %v14732 = vunpack.c.h.b16 %v14165
  %v14733 = vunpack.c.l.b16 %v14166
  %v14734 = vunpack.c.h.b16 %v14166
  %v14735 = vunpack.c.l.b16 %v14167
  %v14736 = vunpack.c.h.b16 %v14167
  %v14737 = vunpack.c.l.b16 %v14168
  %v14738 = vunpack.c.h.b16 %v14168
  %v14739 = vunpack.c.l.b16 %v14169
  %v14740 = vunpack.c.h.b16 %v14169
  %v14741 = vunpack.c.l.b16 %v14170
  %v14742 = vunpack.c.h.b16 %v14170
  %v14743 = vunpack.c.l.b16 %v14171
  %v14744 = vunpack.c.h.b16 %v14171
  %v14745 = vunpack.c.l.b16 %v14172
  %v14746 = vunpack.c.h.b16 %v14172
  %v14747 = vunpack.c.l.b16 %v14173
  %v14748 = vunpack.c.h.b16 %v14173
  %v14749 = vunpack.c.l.b16 %v14174
  %v14750 = vunpack.c.h.b16 %v14174
  %v14751 = vunpack.c.l.b16 %v14175
  %v14752 = vunpack.c.h.b16 %v14175
  %v14753 = vunpack.c.l.b16 %v14176
  %v14754 = vunpack.c.h.b16 %v14176
  %v14755 = vunpack.c.l.b16 %v14177
  %v14756 = vunpack.c.h.b16 %v14177
  %v14757 = vunpack.c.l.b16 %v14178
  %v14758 = vunpack.c.h.b16 %v14178
  %v14759 = vunpack.c.l.b16 %v14179
  %v14760 = vunpack.c.h.b16 %v14179
  %v14761 = vunpack.c.l.b16 %v14180
  %v14762 = vunpack.c.h.b16 %v14180
  %v14763 = vunpack.c.l.b16 %v14181
  %v14764 = vunpack.c.h.b16 %v14181
  %v14765 = vunpack.c.l.b16 %v14182
  %v14766 = vunpack.c.h.b16 %v14182
  %v14767 = vunpack.c.l.b16 %v14183
  %v14768 = vunpack.c.h.b16 %v14183
  %v14769 = vunpack.c.l.b16 %v14184
  %v14770 = vunpack.c.h.b16 %v14184
  %v14771 = vunpack.c.l.b16 %v14185
  %v14772 = vunpack.c.h.b16 %v14185
  %v14773 = vunpack.c.l.b16 %v14186
  %v14774 = vunpack.c.h.b16 %v14186
  %v14775 = vunpack.c.l.b16 %v14187
  %v14776 = vunpack.c.h.b16 %v14187
  %v14777 = vunpack.c.l.b16 %v14188
  %v14778 = vunpack.c.h.b16 %v14188
  %v14779 = vunpack.c.l.b16 %v14189
  %v14780 = vunpack.c.h.b16 %v14189
  %v14781 = vunpack.c.l.b16 %v14190
  %v14782 = vunpack.c.h.b16 %v14190
  %v14783 = vunpack.c.l.b16 %v14191
  %v14784 = vunpack.c.h.b16 %v14191
  %v14785 = vunpack.c.l.b16 %v14192
  %v14786 = vunpack.c.h.b16 %v14192
  %v14787 = vunpack.c.l.b16 %v14193
  %v14788 = vunpack.c.h.b16 %v14193
  %v14789 = vunpack.c.l.b16 %v14194
  %v14790 = vunpack.c.h.b16 %v14194
  %v14791 = vunpack.c.l.b16 %v14195
  %v14792 = vunpack.c.h.b16 %v14195
  %v14793 = vunpack.c.l.b16 %v14196
  %v14794 = vunpack.c.h.b16 %v14196
  %v14795 = vunpack.c.l.b16 %v14197
  %v14796 = vunpack.c.h.b16 %v14197
  %v14797 = vunpack.c.l.b16 %v14198
  %v14798 = vunpack.c.h.b16 %v14198
  %v14799 = vunpack.c.l.b16 %v14199
  %v14800 = vunpack.c.h.b16 %v14199
  %v14801 = vunpack.c.l.b16 %v14200
  %v14802 = vunpack.c.h.b16 %v14200
  %v14803 = vunpack.c.l.b16 %v14201
  %v14804 = vunpack.c.h.b16 %v14201
  %v14805 = vunpack.c.l.b16 %v14202
  %v14806 = vunpack.c.h.b16 %v14202
  %v14807 = vunpack.c.l.b16 %v14203
  %v14808 = vunpack.c.h.b16 %v14203
  %v14809 = vunpack.c.l.b16 %v14204
  %v14810 = vunpack.c.h.b16 %v14204
  %v14811 = vunpack.c.l.b16 %v14205
  %v14812 = vunpack.c.h.b16 %v14205
  %v14813 = vunpack.c.l.b16 %v14206
  %v14814 = vunpack.c.h.b16 %v14206
  %v14815 = vunpack.c.l.b16 %v14207
  %v14816 = vunpack.c.h.b16 %v14207
  %v14817 = vunpack.c.l.b16 %v14208
  %v14818 = vunpack.c.h.b16 %v14208
  %v14819 = vunpack.c.l.b16 %v14209
  %v14820 = vunpack.c.h.b16 %v14209
  %v14821 = vunpack.c.l.b16 %v14210
  %v14822 = vunpack.c.h.b16 %v14210
  %v14823 = vunpack.c.l.b16 %v14211
  %v14824 = vunpack.c.h.b16 %v14211
  %v14825 = vunpack.c.l.b16 %v14212
  %v14826 = vunpack.c.h.b16 %v14212
  %v14827 = vunpack.c.l.b16 %v14213
  %v14828 = vunpack.c.h.b16 %v14213
  %v14829 = vunpack.c.l.b16 %v14214
  %v14830 = vunpack.c.h.b16 %v14214
  %v14831 = vunpack.c.l.b16 %v14215
  %v14832 = vunpack.c.h.b16 %v14215
  %v14833 = vunpack.c.l.b16 %v14216
  %v14834 = vunpack.c.h.b16 %v14216
  %v14835 = vunpack.c.l.b16 %v14217
  %v14836 = vunpack.c.h.b16 %v14217
  %v14837 = vunpack.c.l.b16 %v14218
  %v14838 = vunpack.c.h.b16 %v14218
  %v14839 = vunpack.c.l.b16 %v14219
  %v14840 = vunpack.c.h.b16 %v14219
  %v14841 = vunpack.c.l.b16 %v14220
  %v14842 = vunpack.c.h.b16 %v14220
  %v14843 = vpack.c.b16 %v14447, %v14443
  %v14844 = vpack.c.b16 %v14448, %v14444
  %v14845 = vpack.c.b16 %v14449, %v14445
  %v14846 = vpack.c.b16 %v14450, %v14446
  %v14847 = vpack.c.b16 %v14455, %v14451
  %v14848 = vpack.c.b16 %v14456, %v14452
  %v14849 = vpack.c.b16 %v14457, %v14453
  %v14850 = vpack.c.b16 %v14458, %v14454
  %v14851 = vpack.c.b16 %v14463, %v14459
  %v14852 = vpack.c.b16 %v14464, %v14460
  %v14853 = vpack.c.b16 %v14465, %v14461
  %v14854 = vpack.c.b16 %v14466, %v14462
  %v14855 = vpack.c.b16 %v14471, %v14467
  %v14856 = vpack.c.b16 %v14472, %v14468
  %v14857 = vpack.c.b16 %v14473, %v14469
  %v14858 = vpack.c.b16 %v14474, %v14470
  %v14859 = vpack.c.b16 %v14479, %v14475
  %v14860 = vpack.c.b16 %v14480, %v14476
  %v14861 = vpack.c.b16 %v14481, %v14477
  %v14862 = vpack.c.b16 %v14482, %v14478
  %v14863 = vpack.c.b16 %v14487, %v14483
  %v14864 = vpack.c.b16 %v14488, %v14484
  %v14865 = vpack.c.b16 %v14489, %v14485
  %v14866 = vpack.c.b16 %v14490, %v14486
  %v14867 = vpack.c.b16 %v14495, %v14491
  %v14868 = vpack.c.b16 %v14496, %v14492
  %v14869 = vpack.c.b16 %v14497, %v14493
  %v14870 = vpack.c.b16 %v14498, %v14494
  %v14871 = vpack.c.b16 %v14503, %v14499
  %v14872 = vpack.c.b16 %v14504, %v14500
  %v14873 = vpack.c.b16 %v14505, %v14501
  %v14874 = vpack.c.b16 %v14506, %v14502
  %v14875 = vpack.c.b16 %v14511, %v14507
  %v14876 = vpack.c.b16 %v14512, %v14508
  %v14877 = vpack.c.b16 %v14513, %v14509
  %v14878 = vpack.c.b16 %v14514, %v14510
  %v14879 = vpack.c.b16 %v14519, %v14515
  %v14880 = vpack.c.b16 %v14520, %v14516
  %v14881 = vpack.c.b16 %v14521, %v14517
  %v14882 = vpack.c.b16 %v14522, %v14518
  %v14883 = vpack.c.b16 %v14527, %v14523
  %v14884 = vpack.c.b16 %v14528, %v14524
  %v14885 = vpack.c.b16 %v14529, %v14525
  %v14886 = vpack.c.b16 %v14530, %v14526
  %v14887 = vpack.c.b16 %v14535, %v14531
  %v14888 = vpack.c.b16 %v14536, %v14532
  %v14889 = vpack.c.b16 %v14537, %v14533
  %v14890 = vpack.c.b16 %v14538, %v14534
  %v14891 = vpack.c.b16 %v14543, %v14539
  %v14892 = vpack.c.b16 %v14544, %v14540
  %v14893 = vpack.c.b16 %v14545, %v14541
  %v14894 = vpack.c.b16 %v14546, %v14542
  %v14895 = vpack.c.b16 %v14551, %v14547
  %v14896 = vpack.c.b16 %v14552, %v14548
  %v14897 = vpack.c.b16 %v14553, %v14549
  %v14898 = vpack.c.b16 %v14554, %v14550
  %v14899 = vpack.c.b16 %v14559, %v14555
  %v14900 = vpack.c.b16 %v14560, %v14556
  %v14901 = vpack.c.b16 %v14561, %v14557
  %v14902 = vpack.c.b16 %v14562, %v14558
  %v14903 = vpack.c.b16 %v14567, %v14563
  %v14904 = vpack.c.b16 %v14568, %v14564
  %v14905 = vpack.c.b16 %v14569, %v14565
  %v14906 = vpack.c.b16 %v14570, %v14566
  %v14907 = vpack.c.b16 %v14575, %v14571
  %v14908 = vpack.c.b16 %v14576, %v14572
  %v14909 = vpack.c.b16 %v14577, %v14573
  %v14910 = vpack.c.b16 %v14578, %v14574
  %v14911 = vpack.c.b16 %v14583, %v14579
  %v14912 = vpack.c.b16 %v14584, %v14580
  %v14913 = vpack.c.b16 %v14585, %v14581
  %v14914 = vpack.c.b16 %v14586, %v14582
  %v14915 = vpack.c.b16 %v14591, %v14587
  %v14916 = vpack.c.b16 %v14592, %v14588
  %v14917 = vpack.c.b16 %v14593, %v14589
  %v14918 = vpack.c.b16 %v14594, %v14590
  %v14919 = vpack.c.b16 %v14599, %v14595
  %v14920 = vpack.c.b16 %v14600, %v14596
  %v14921 = vpack.c.b16 %v14601, %v14597
  %v14922 = vpack.c.b16 %v14602, %v14598
  %v14923 = vpack.c.b16 %v14607, %v14603
  %v14924 = vpack.c.b16 %v14608, %v14604
  %v14925 = vpack.c.b16 %v14609, %v14605
  %v14926 = vpack.c.b16 %v14610, %v14606
  %v14927 = vpack.c.b16 %v14615, %v14611
  %v14928 = vpack.c.b16 %v14616, %v14612
  %v14929 = vpack.c.b16 %v14617, %v14613
  %v14930 = vpack.c.b16 %v14618, %v14614
  %v14931 = vpack.c.b16 %v14623, %v14619
  %v14932 = vpack.c.b16 %v14624, %v14620
  %v14933 = vpack.c.b16 %v14625, %v14621
  %v14934 = vpack.c.b16 %v14626, %v14622
  %v14935 = vpack.c.b16 %v14631, %v14627
  %v14936 = vpack.c.b16 %v14632, %v14628
  %v14937 = vpack.c.b16 %v14633, %v14629
  %v14938 = vpack.c.b16 %v14634, %v14630
  %v14939 = vpack.c.b16 %v14639, %v14635
  %v14940 = vpack.c.b16 %v14640, %v14636
  %v14941 = vpack.c.b16 %v14641, %v14637
  %v14942 = vpack.c.b16 %v14642, %v14638
  %v14943 = vpack.c.b16 %v14647, %v14643
  %v14944 = vpack.c.b16 %v14648, %v14644
  %v14945 = vpack.c.b16 %v14649, %v14645
  %v14946 = vpack.c.b16 %v14650, %v14646
  %v14947 = vpack.c.b16 %v14655, %v14651
  %v14948 = vpack.c.b16 %v14656, %v14652
  %v14949 = vpack.c.b16 %v14657, %v14653
  %v14950 = vpack.c.b16 %v14658, %v14654
  %v14951 = vpack.c.b16 %v14663, %v14659
  %v14952 = vpack.c.b16 %v14664, %v14660
  %v14953 = vpack.c.b16 %v14665, %v14661
  %v14954 = vpack.c.b16 %v14666, %v14662
  %v14955 = vpack.c.b16 %v14671, %v14667
  %v14956 = vpack.c.b16 %v14672, %v14668
  %v14957 = vpack.c.b16 %v14673, %v14669
  %v14958 = vpack.c.b16 %v14674, %v14670
  %v14959 = vpack.c.b16 %v14679, %v14675
  %v14960 = vpack.c.b16 %v14680, %v14676
  %v14961 = vpack.c.b16 %v14681, %v14677
  %v14962 = vpack.c.b16 %v14682, %v14678
  %v14963 = vpack.c.b16 %v14687, %v14683
  %v14964 = vpack.c.b16 %v14688, %v14684
  %v14965 = vpack.c.b16 %v14689, %v14685
  %v14966 = vpack.c.b16 %v14690, %v14686
  %v14967 = vpack.c.b16 %v14695, %v14691
  %v14968 = vpack.c.b16 %v14696, %v14692
  %v14969 = vpack.c.b16 %v14697, %v14693
  %v14970 = vpack.c.b16 %v14698, %v14694
  %v14971 = vpack.c.b16 %v14703, %v14699
  %v14972 = vpack.c.b16 %v14704, %v14700
  %v14973 = vpack.c.b16 %v14705, %v14701
  %v14974 = vpack.c.b16 %v14706, %v14702
  %v14975 = vpack.c.b16 %v14711, %v14707
  %v14976 = vpack.c.b16 %v14712, %v14708
  %v14977 = vpack.c.b16 %v14713, %v14709
  %v14978 = vpack.c.b16 %v14714, %v14710
  %v14979 = vpack.c.b16 %v14719, %v14715
  %v14980 = vpack.c.b16 %v14720, %v14716
  %v14981 = vpack.c.b16 %v14721, %v14717
  %v14982 = vpack.c.b16 %v14722, %v14718
  %v14983 = vpack.c.b16 %v14727, %v14723
  %v14984 = vpack.c.b16 %v14728, %v14724
  %v14985 = vpack.c.b16 %v14729, %v14725
  %v14986 = vpack.c.b16 %v14730, %v14726
  %v14987 = vpack.c.b16 %v14735, %v14731
  %v14988 = vpack.c.b16 %v14736, %v14732
  %v14989 = vpack.c.b16 %v14737, %v14733
  %v14990 = vpack.c.b16 %v14738, %v14734
  %v14991 = vpack.c.b16 %v14743, %v14739
  %v14992 = vpack.c.b16 %v14744, %v14740
  %v14993 = vpack.c.b16 %v14745, %v14741
  %v14994 = vpack.c.b16 %v14746, %v14742
  %v14995 = vpack.c.b16 %v14751, %v14747
  %v14996 = vpack.c.b16 %v14752, %v14748
  %v14997 = vpack.c.b16 %v14753, %v14749
  %v14998 = vpack.c.b16 %v14754, %v14750
  %v14999 = vpack.c.b16 %v14759, %v14755
  %v15000 = vpack.c.b16 %v14760, %v14756
  %v15001 = vpack.c.b16 %v14761, %v14757
  %v15002 = vpack.c.b16 %v14762, %v14758
  %v15003 = vpack.c.b16 %v14767, %v14763
  %v15004 = vpack.c.b16 %v14768, %v14764
  %v15005 = vpack.c.b16 %v14769, %v14765
  %v15006 = vpack.c.b16 %v14770, %v14766
  %v15007 = vpack.c.b16 %v14775, %v14771
  %v15008 = vpack.c.b16 %v14776, %v14772
  %v15009 = vpack.c.b16 %v14777, %v14773
  %v15010 = vpack.c.b16 %v14778, %v14774
  %v15011 = vpack.c.b16 %v14783, %v14779
  %v15012 = vpack.c.b16 %v14784, %v14780
  %v15013 = vpack.c.b16 %v14785, %v14781
  %v15014 = vpack.c.b16 %v14786, %v14782
  %v15015 = vpack.c.b16 %v14791, %v14787
  %v15016 = vpack.c.b16 %v14792, %v14788
  %v15017 = vpack.c.b16 %v14793, %v14789
  %v15018 = vpack.c.b16 %v14794, %v14790
  %v15019 = vpack.c.b16 %v14799, %v14795
  %v15020 = vpack.c.b16 %v14800, %v14796
  %v15021 = vpack.c.b16 %v14801, %v14797
  %v15022 = vpack.c.b16 %v14802, %v14798
  %v15023 = vpack.c.b16 %v14807, %v14803
  %v15024 = vpack.c.b16 %v14808, %v14804
  %v15025 = vpack.c.b16 %v14809, %v14805
  %v15026 = vpack.c.b16 %v14810, %v14806
  %v15027 = vpack.c.b16 %v14815, %v14811
  %v15028 = vpack.c.b16 %v14816, %v14812
  %v15029 = vpack.c.b16 %v14817, %v14813
  %v15030 = vpack.c.b16 %v14818, %v14814
  %v15031 = vpack.c.b16 %v14823, %v14819
  %v15032 = vpack.c.b16 %v14824, %v14820
  %v15033 = vpack.c.b16 %v14825, %v14821
  %v15034 = vpack.c.b16 %v14826, %v14822
  %v15035 = vpack.c.b16 %v14831, %v14827
  %v15036 = vpack.c.b16 %v14832, %v14828
  %v15037 = vpack.c.b16 %v14833, %v14829
  %v15038 = vpack.c.b16 %v14834, %v14830
  %v15039 = vpack.c.b16 %v14839, %v14835
  %v15040 = vpack.c.b16 %v14840, %v14836
  %v15041 = vpack.c.b16 %v14841, %v14837
  %v15042 = vpack.c.b16 %v14842, %v14838
  %v15243 = vsel %vm9446, %v13973, 0
  %15245 = vmatprep.subr.bf16.mxu0 %v14844
  %15246 = vmatpush1.bf16.msra.mxu0 %v14843
  %15247 = vmatprep.subr.bf16.mxu0 %v14848
  %15248 = vmatpush1.bf16.msra.mxu0 %v14847
  %15249 = vmatprep.subr.bf16.mxu0 %v14852
  %15250 = vmatpush1.bf16.msra.mxu0 %v14851
  %15251 = vmatprep.subr.bf16.mxu0 %v14856
  %15252 = vmatpush1.bf16.msra.mxu0 %v14855
  %15253 = vmatprep.subr.bf16.mxu0 %v14860
  %15254 = vmatpush1.bf16.msra.mxu0 %v14859
  %15255 = vmatprep.subr.bf16.mxu0 %v14864
  %15256 = vmatpush1.bf16.msra.mxu0 %v14863
  %15257 = vmatprep.subr.bf16.mxu0 %v14868
  %15258 = vmatpush1.bf16.msra.mxu0 %v14867
  %15259 = vmatprep.subr.bf16.mxu0 %v14872
  %15260 = vmatpush1.bf16.msra.mxu0 %v14871
  %15261 = vmatprep.subr.bf16.mxu0 %v14876
  %15262 = vmatpush1.bf16.msra.mxu0 %v14875
  %15263 = vmatprep.subr.bf16.mxu0 %v14880
  %15264 = vmatpush1.bf16.msra.mxu0 %v14879
  %15265 = vmatprep.subr.bf16.mxu0 %v14884
  %15266 = vmatpush1.bf16.msra.mxu0 %v14883
  %15267 = vmatprep.subr.bf16.mxu0 %v14888
  %15268 = vmatpush1.bf16.msra.mxu0 %v14887
  %15269 = vmatprep.subr.bf16.mxu0 %v14892
  %15270 = vmatpush1.bf16.msra.mxu0 %v14891
  %15271 = vmatprep.subr.bf16.mxu0 %v14896
  %15272 = vmatpush1.bf16.msra.mxu0 %v14895
  %15273 = vmatprep.subr.bf16.mxu0 %v14900
  %15274 = vmatpush1.bf16.msra.mxu0 %v14899
  %15275 = vmatprep.subr.bf16.mxu0 %v14904
  %15276 = vmatpush1.bf16.msra.mxu0 %v14903
  %15277 = vmatprep.mubr.bf16.mxu0 %v13988
  %15278 = vmatmul.mubr.bf16.gmra.mrb[0].mxu0 %v13979
  %v15279 = vpop.f32.mrb[0].mxu0
  %v15280 = vadd.f32 %v14226, %v15279
  %v15281 = vpop.f32.mrb[0].mxu0
  %v15282 = vadd.f32 %v14230, %v15281
  %v15283 = vpop.f32.mrb[0].mxu0
  %v15284 = vpop.f32.mrb[0].mxu0
  %15285 = vdwg.mxu0
  %15286 = vmatprep.subr.bf16.mxu0 %v14908
  %15287 = vmatpush1.bf16.msra.mxu0 %v14907
  %15288 = vmatprep.subr.bf16.mxu0 %v14912
  %15289 = vmatpush1.bf16.msra.mxu0 %v14911
  %15290 = vmatprep.subr.bf16.mxu0 %v14916
  %15291 = vmatpush1.bf16.msra.mxu0 %v14915
  %15292 = vmatprep.subr.bf16.mxu0 %v14920
  %15293 = vmatpush1.bf16.msra.mxu0 %v14919
  %15294 = vmatprep.subr.bf16.mxu0 %v14924
  %15295 = vmatpush1.bf16.msra.mxu0 %v14923
  %15296 = vmatprep.subr.bf16.mxu0 %v14928
  %15297 = vmatpush1.bf16.msra.mxu0 %v14927
  %15298 = vmatprep.subr.bf16.mxu0 %v14932
  %15299 = vmatpush1.bf16.msra.mxu0 %v14931
  %15300 = vmatprep.subr.bf16.mxu0 %v14936
  %15301 = vmatpush1.bf16.msra.mxu0 %v14935
  %15302 = vmatprep.subr.bf16.mxu0 %v14940
  %15303 = vmatpush1.bf16.msra.mxu0 %v14939
  %15304 = vmatprep.subr.bf16.mxu0 %v14944
  %15305 = vmatpush1.bf16.msra.mxu0 %v14943
  %15306 = vmatprep.subr.bf16.mxu0 %v14948
  %15307 = vmatpush1.bf16.msra.mxu0 %v14947
  %15308 = vmatprep.subr.bf16.mxu0 %v14952
  %15309 = vmatpush1.bf16.msra.mxu0 %v14951
  %15310 = vmatprep.subr.bf16.mxu0 %v14956
  %15311 = vmatpush1.bf16.msra.mxu0 %v14955
  %15312 = vmatprep.subr.bf16.mxu0 %v14960
  %15313 = vmatpush1.bf16.msra.mxu0 %v14959
  %15314 = vmatprep.subr.bf16.mxu0 %v14964
  %15315 = vmatpush1.bf16.msra.mxu0 %v14963
  %15316 = vmatprep.subr.bf16.mxu0 %v14968
  %15317 = vmatpush1.bf16.msra.mxu0 %v14967
  %15318 = vmatprep.mubr.bf16.mxu0 %v14003
  %15319 = vmatmul.mubr.bf16.gmra.mrb[0].mxu0 %v13994
  %v15320 = vpop.f32.mrb[0].mxu0
  %v15321 = vadd.f32 %v15280, %v15320
  %v15322 = vpop.f32.mrb[0].mxu0
  %v15323 = vadd.f32 %v15282, %v15322
  %v15324 = vpop.f32.mrb[0].mxu0
  %v15325 = vpop.f32.mrb[0].mxu0
  %15326 = vdwg.mxu0
  %15327 = vmatprep.subr.bf16.mxu0 %v14972
  %15328 = vmatpush1.bf16.msra.mxu0 %v14971
  %15329 = vmatprep.subr.bf16.mxu0 %v14976
  %15330 = vmatpush1.bf16.msra.mxu0 %v14975
  %15331 = vmatprep.subr.bf16.mxu0 %v14980
  %15332 = vmatpush1.bf16.msra.mxu0 %v14979
  %15333 = vmatprep.subr.bf16.mxu0 %v14984
  %15334 = vmatpush1.bf16.msra.mxu0 %v14983
  %15335 = vmatprep.subr.bf16.mxu0 %v14988
  %15336 = vmatpush1.bf16.msra.mxu0 %v14987
  %15337 = vmatprep.subr.bf16.mxu0 %v14992
  %15338 = vmatpush1.bf16.msra.mxu0 %v14991
  %15339 = vmatprep.subr.bf16.mxu0 %v14996
  %15340 = vmatpush1.bf16.msra.mxu0 %v14995
  %15341 = vmatprep.subr.bf16.mxu0 %v15000
  %15342 = vmatpush1.bf16.msra.mxu0 %v14999
  %15343 = vmatprep.subr.bf16.mxu0 %v15004
  %15344 = vmatpush1.bf16.msra.mxu0 %v15003
  %15345 = vmatprep.subr.bf16.mxu0 %v15008
  %15346 = vmatpush1.bf16.msra.mxu0 %v15007
  %15347 = vmatprep.subr.bf16.mxu0 %v15012
  %15348 = vmatpush1.bf16.msra.mxu0 %v15011
  %15349 = vmatprep.subr.bf16.mxu0 %v15016
  %15350 = vmatpush1.bf16.msra.mxu0 %v15015
  %15351 = vmatprep.subr.bf16.mxu0 %v15020
  %15352 = vmatpush1.bf16.msra.mxu0 %v15019
  %15353 = vmatprep.subr.bf16.mxu0 %v15024
  %15354 = vmatpush1.bf16.msra.mxu0 %v15023
  %15355 = vmatprep.subr.bf16.mxu0 %v15028
  %15356 = vmatpush1.bf16.msra.mxu0 %v15027
  %15357 = vmatprep.subr.bf16.mxu0 %v15032
  %15358 = vmatpush1.bf16.msra.mxu0 %v15031
  %15359 = vmatprep.mubr.bf16.mxu0 %v14019
  %15360 = vmatmul.mubr.bf16.gmra.mrb[0].mxu0 %v14010
  %v15361 = vpop.f32.mrb[0].mxu0
  %v15362 = vadd.f32 %v15321, %v15361
  %v15363 = vpop.f32.mrb[0].mxu0
  %v15364 = vadd.f32 %v15323, %v15363
  %v15365 = vpop.f32.mrb[0].mxu0
  %v15366 = vpop.f32.mrb[0].mxu0
  %15367 = vdwg.mxu0
  %15368 = vmatprep.subr.bf16.mxu0 %v15036
  %15369 = vmatpush1.bf16.msra.mxu0 %v15035
  %15370 = vmatprep.subr.bf16.mxu0 %v15040
  %15371 = vmatpush1.bf16.msra.mxu0 %v15039
  %15372 = vmatprep.subr.bf16.mxu0 0
  %15373 = vmatpush1.bf16.msra.mxu0 0
  %15374 = vmatprep.subr.bf16.mxu0 0
  %15375 = vmatpush1.bf16.msra.mxu0 0
  %15376 = vmatprep.subr.bf16.mxu0 0
  %15377 = vmatpush1.bf16.msra.mxu0 0
  %15378 = vmatprep.subr.bf16.mxu0 0
  %15379 = vmatpush1.bf16.msra.mxu0 0
  %15380 = vmatprep.subr.bf16.mxu0 0
  %15381 = vmatpush1.bf16.msra.mxu0 0
  %15382 = vmatprep.subr.bf16.mxu0 0
  %15383 = vmatpush1.bf16.msra.mxu0 0
  %15384 = vmatprep.subr.bf16.mxu0 0
  %15385 = vmatpush1.bf16.msra.mxu0 0
  %15386 = vmatprep.subr.bf16.mxu0 0
  %15387 = vmatpush1.bf16.msra.mxu0 0
  %15388 = vmatprep.subr.bf16.mxu0 0
  %15389 = vmatpush1.bf16.msra.mxu0 0
  %15390 = vmatprep.subr.bf16.mxu0 0
  %15391 = vmatpush1.bf16.msra.mxu0 0
  %15392 = vmatprep.subr.bf16.mxu0 0
  %15393 = vmatpush1.bf16.msra.mxu0 0
  %15394 = vmatprep.subr.bf16.mxu0 0
  %15395 = vmatpush1.bf16.msra.mxu0 0
  %15396 = vmatprep.subr.bf16.mxu0 0
  %15397 = vmatpush1.bf16.msra.mxu0 0
  %15398 = vmatprep.subr.bf16.mxu0 0
  %15399 = vmatpush1.bf16.msra.mxu0 0
  %15400 = vmatprep.mubr.bf16.mxu0 0
  %15401 = vmatmul.mubr.bf16.gmra.mrb[0].mxu0 %v15243
  %v15402 = vpop.f32.mrb[0].mxu0
  %v15403 = vadd.f32 %v15362, %v15402
  %v15404 = vpop.f32.mrb[0].mxu0
  %v15405 = vadd.f32 %v15364, %v15404
  %v15406 = vpop.f32.mrb[0].mxu0
  %v15407 = vpop.f32.mrb[0].mxu0
  %15408 = vdwg.mxu0
  %15409 = vmatprep.subr.bf16.mxu0 %v14846
  %15410 = vmatpush1.bf16.msra.mxu0 %v14845
  %15411 = vmatprep.subr.bf16.mxu0 %v14850
  %15412 = vmatpush1.bf16.msra.mxu0 %v14849
  %15413 = vmatprep.subr.bf16.mxu0 %v14854
  %15414 = vmatpush1.bf16.msra.mxu0 %v14853
  %15415 = vmatprep.subr.bf16.mxu0 %v14858
  %15416 = vmatpush1.bf16.msra.mxu0 %v14857
  %15417 = vmatprep.subr.bf16.mxu0 %v14862
  %15418 = vmatpush1.bf16.msra.mxu0 %v14861
  %15419 = vmatprep.subr.bf16.mxu0 %v14866
  %15420 = vmatpush1.bf16.msra.mxu0 %v14865
  %15421 = vmatprep.subr.bf16.mxu0 %v14870
  %15422 = vmatpush1.bf16.msra.mxu0 %v14869
  %15423 = vmatprep.subr.bf16.mxu0 %v14874
  %15424 = vmatpush1.bf16.msra.mxu0 %v14873
  %15425 = vmatprep.subr.bf16.mxu0 %v14878
  %15426 = vmatpush1.bf16.msra.mxu0 %v14877
  %15427 = vmatprep.subr.bf16.mxu0 %v14882
  %15428 = vmatpush1.bf16.msra.mxu0 %v14881
  %15429 = vmatprep.subr.bf16.mxu0 %v14886
  %15430 = vmatpush1.bf16.msra.mxu0 %v14885
  %15431 = vmatprep.subr.bf16.mxu0 %v14890
  %15432 = vmatpush1.bf16.msra.mxu0 %v14889
  %15433 = vmatprep.subr.bf16.mxu0 %v14894
  %15434 = vmatpush1.bf16.msra.mxu0 %v14893
  %15435 = vmatprep.subr.bf16.mxu0 %v14898
  %15436 = vmatpush1.bf16.msra.mxu0 %v14897
  %15437 = vmatprep.subr.bf16.mxu0 %v14902
  %15438 = vmatpush1.bf16.msra.mxu0 %v14901
  %15439 = vmatprep.subr.bf16.mxu0 %v14906
  %15440 = vmatpush1.bf16.msra.mxu0 %v14905
  %15441 = vmatprep.mubr.bf16.mxu0 %v13988
  %15442 = vmatmul.mubr.bf16.gmra.mrb[0].mxu0 %v13979
  %v15443 = vpop.f32.mrb[0].mxu0
  %v15444 = vadd.f32 %v14234, %v15443
  %v15445 = vpop.f32.mrb[0].mxu0
  %v15446 = vadd.f32 %v14238, %v15445
  %v15447 = vpop.f32.mrb[0].mxu0
  %v15448 = vpop.f32.mrb[0].mxu0
  %15449 = vdwg.mxu0
  %15450 = vmatprep.subr.bf16.mxu0 %v14910
  %15451 = vmatpush1.bf16.msra.mxu0 %v14909
  %15452 = vmatprep.subr.bf16.mxu0 %v14914
  %15453 = vmatpush1.bf16.msra.mxu0 %v14913
  %15454 = vmatprep.subr.bf16.mxu0 %v14918
  %15455 = vmatpush1.bf16.msra.mxu0 %v14917
  %15456 = vmatprep.subr.bf16.mxu0 %v14922
  %15457 = vmatpush1.bf16.msra.mxu0 %v14921
  %15458 = vmatprep.subr.bf16.mxu0 %v14926
  %15459 = vmatpush1.bf16.msra.mxu0 %v14925
  %15460 = vmatprep.subr.bf16.mxu0 %v14930
  %15461 = vmatpush1.bf16.msra.mxu0 %v14929
  %15462 = vmatprep.subr.bf16.mxu0 %v14934
  %15463 = vmatpush1.bf16.msra.mxu0 %v14933
  %15464 = vmatprep.subr.bf16.mxu0 %v14938
  %15465 = vmatpush1.bf16.msra.mxu0 %v14937
  %15466 = vmatprep.subr.bf16.mxu0 %v14942
  %15467 = vmatpush1.bf16.msra.mxu0 %v14941
  %15468 = vmatprep.subr.bf16.mxu0 %v14946
  %15469 = vmatpush1.bf16.msra.mxu0 %v14945
  %15470 = vmatprep.subr.bf16.mxu0 %v14950
  %15471 = vmatpush1.bf16.msra.mxu0 %v14949
  %15472 = vmatprep.subr.bf16.mxu0 %v14954
  %15473 = vmatpush1.bf16.msra.mxu0 %v14953
  %15474 = vmatprep.subr.bf16.mxu0 %v14958
  %15475 = vmatpush1.bf16.msra.mxu0 %v14957
  %15476 = vmatprep.subr.bf16.mxu0 %v14962
  %15477 = vmatpush1.bf16.msra.mxu0 %v14961
  %15478 = vmatprep.subr.bf16.mxu0 %v14966
  %15479 = vmatpush1.bf16.msra.mxu0 %v14965
  %15480 = vmatprep.subr.bf16.mxu0 %v14970
  %15481 = vmatpush1.bf16.msra.mxu0 %v14969
  %15482 = vmatprep.mubr.bf16.mxu0 %v14003
  %15483 = vmatmul.mubr.bf16.gmra.mrb[0].mxu0 %v13994
  %v15484 = vpop.f32.mrb[0].mxu0
  %v15485 = vadd.f32 %v15444, %v15484
  %v15486 = vpop.f32.mrb[0].mxu0
  %v15487 = vadd.f32 %v15446, %v15486
  %v15488 = vpop.f32.mrb[0].mxu0
  %v15489 = vpop.f32.mrb[0].mxu0
  %15490 = vdwg.mxu0
  %15491 = vmatprep.subr.bf16.mxu0 %v14974
  %15492 = vmatpush1.bf16.msra.mxu0 %v14973
  %15493 = vmatprep.subr.bf16.mxu0 %v14978
  %15494 = vmatpush1.bf16.msra.mxu0 %v14977
  %15495 = vmatprep.subr.bf16.mxu0 %v14982
  %15496 = vmatpush1.bf16.msra.mxu0 %v14981
  %15497 = vmatprep.subr.bf16.mxu0 %v14986
  %15498 = vmatpush1.bf16.msra.mxu0 %v14985
  %15499 = vmatprep.subr.bf16.mxu0 %v14990
  %15500 = vmatpush1.bf16.msra.mxu0 %v14989
  %15501 = vmatprep.subr.bf16.mxu0 %v14994
  %15502 = vmatpush1.bf16.msra.mxu0 %v14993
  %15503 = vmatprep.subr.bf16.mxu0 %v14998
  %15504 = vmatpush1.bf16.msra.mxu0 %v14997
  %15505 = vmatprep.subr.bf16.mxu0 %v15002
  %15506 = vmatpush1.bf16.msra.mxu0 %v15001
  %15507 = vmatprep.subr.bf16.mxu0 %v15006
  %15508 = vmatpush1.bf16.msra.mxu0 %v15005
  %15509 = vmatprep.subr.bf16.mxu0 %v15010
  %15510 = vmatpush1.bf16.msra.mxu0 %v15009
  %15511 = vmatprep.subr.bf16.mxu0 %v15014
  %15512 = vmatpush1.bf16.msra.mxu0 %v15013
  %15513 = vmatprep.subr.bf16.mxu0 %v15018
  %15514 = vmatpush1.bf16.msra.mxu0 %v15017
  %15515 = vmatprep.subr.bf16.mxu0 %v15022
  %15516 = vmatpush1.bf16.msra.mxu0 %v15021
  %15517 = vmatprep.subr.bf16.mxu0 %v15026
  %15518 = vmatpush1.bf16.msra.mxu0 %v15025
  %15519 = vmatprep.subr.bf16.mxu0 %v15030
  %15520 = vmatpush1.bf16.msra.mxu0 %v15029
  %15521 = vmatprep.subr.bf16.mxu0 %v15034
  %15522 = vmatpush1.bf16.msra.mxu0 %v15033
  %15523 = vmatprep.mubr.bf16.mxu0 %v14019
  %15524 = vmatmul.mubr.bf16.gmra.mrb[0].mxu0 %v14010
  %v15525 = vpop.f32.mrb[0].mxu0
  %v15526 = vadd.f32 %v15485, %v15525
  %v15527 = vpop.f32.mrb[0].mxu0
  %v15528 = vadd.f32 %v15487, %v15527
  %v15529 = vpop.f32.mrb[0].mxu0
  %v15530 = vpop.f32.mrb[0].mxu0
  %15531 = vdwg.mxu0
  %15532 = vmatprep.subr.bf16.mxu0 %v15038
  %15533 = vmatpush1.bf16.msra.mxu0 %v15037
  %15534 = vmatprep.subr.bf16.mxu0 %v15042
  %15535 = vmatpush1.bf16.msra.mxu0 %v15041
  %15536 = vmatprep.subr.bf16.mxu0 0
  %15537 = vmatpush1.bf16.msra.mxu0 0
  %15538 = vmatprep.subr.bf16.mxu0 0
  %15539 = vmatpush1.bf16.msra.mxu0 0
  %15540 = vmatprep.subr.bf16.mxu0 0
  %15541 = vmatpush1.bf16.msra.mxu0 0
  %15542 = vmatprep.subr.bf16.mxu0 0
  %15543 = vmatpush1.bf16.msra.mxu0 0
  %15544 = vmatprep.subr.bf16.mxu0 0
  %15545 = vmatpush1.bf16.msra.mxu0 0
  %15546 = vmatprep.subr.bf16.mxu0 0
  %15547 = vmatpush1.bf16.msra.mxu0 0
  %15548 = vmatprep.subr.bf16.mxu0 0
  %15549 = vmatpush1.bf16.msra.mxu0 0
  %15550 = vmatprep.subr.bf16.mxu0 0
  %15551 = vmatpush1.bf16.msra.mxu0 0
  %15552 = vmatprep.subr.bf16.mxu0 0
  %15553 = vmatpush1.bf16.msra.mxu0 0
  %15554 = vmatprep.subr.bf16.mxu0 0
  %15555 = vmatpush1.bf16.msra.mxu0 0
  %15556 = vmatprep.subr.bf16.mxu0 0
  %15557 = vmatpush1.bf16.msra.mxu0 0
  %15558 = vmatprep.subr.bf16.mxu0 0
  %15559 = vmatpush1.bf16.msra.mxu0 0
  %15560 = vmatprep.subr.bf16.mxu0 0
  %15561 = vmatpush1.bf16.msra.mxu0 0
  %15562 = vmatprep.subr.bf16.mxu0 0
  %15563 = vmatpush1.bf16.msra.mxu0 0
  %15564 = vmatprep.mubr.bf16.mxu0 0
  %15565 = vmatmul.mubr.bf16.gmra.mrb[0].mxu0 %v15243
  %v15566 = vpop.f32.mrb[0].mxu0
  %v15567 = vadd.f32 %v15526, %v15566
  %v15568 = vpop.f32.mrb[0].mxu0
  %v15569 = vadd.f32 %v15528, %v15568
  %v15570 = vpop.f32.mrb[0].mxu0
  %v15571 = vpop.f32.mrb[0].mxu0
  %15572 = vdwg.mxu0
  %v15573 = vmax.f32 %v15403, 0.0
  %v15574 = vmax.f32 %v15405, 0.0
  %v15575 = vmax.f32 %v15567, 0.0
  %v15576 = vmax.f32 %v15569, 0.0
  %v15577 = vpack.c.bf16 %v15573, %v15573
  %v15578 = vpack.c.bf16 %v15574, %v15574
  %v15579 = vpack.c.bf16 %v15575, %v15575
  %v15580 = vpack.c.bf16 %v15576, %v15576
  %v15581 = vld [vmem:[%s7] sm:$0xf]
  %v15582 = vld [vmem:[%s7 + $0x4] sm:$0xf]
  %v15583 = vld [vmem:[%s7 + $0x8] sm:$0xf]
  %v15584 = vld [vmem:[%s7 + $0xc] sm:$0xf]
  %v15585 = vld [vmem:[%s7 + $0x10] sm:$0xf]
  %v15586 = vld [vmem:[%s7 + $0x14] sm:$0xf]
  %v15587 = vld [vmem:[%s7 + $0x18] sm:$0xf]
  %v15588 = vld [vmem:[%s7 + $0x1c] sm:$0xf]
  %v15589 = vld [vmem:[%s7 + $0x20] sm:$0xf]
  %v15590 = vld [vmem:[%s7 + $0x24] sm:$0xf]
  %v15591 = vld [vmem:[%s7 + $0x28] sm:$0xf]
  %v15592 = vld [vmem:[%s7 + $0x2c] sm:$0xf]
  %v15593 = vld [vmem:[%s7 + $0x30] sm:$0xf]
  %v15594 = vld [vmem:[%s7 + $0x34] sm:$0xf]
  %v15595 = vld [vmem:[%s7 + $0x38] sm:$0xf]
  %v15596 = vld [vmem:[%s7 + $0x3c] sm:$0xf]
  %v15597 = vld [vmem:[%s7 + $0x40] sm:$0xf]
  %v15598 = vld [vmem:[%s7 + $0x44] sm:$0xf]
  %v15599 = vld [vmem:[%s7 + $0x48] sm:$0xf]
  %v15600 = vld [vmem:[%s7 + $0x4c] sm:$0xf]
  %v15601 = vld [vmem:[%s7 + $0x50] sm:$0xf]
  %v15602 = vld [vmem:[%s7 + $0x54] sm:$0xf]
  %v15603 = vld [vmem:[%s7 + $0x58] sm:$0xf]
  %v15604 = vld [vmem:[%s7 + $0x5c] sm:$0xf]
  %v15605 = vld [vmem:[%s7 + $0x60] sm:$0xf]
  %v15606 = vld [vmem:[%s7 + $0x64] sm:$0xf]
  %v15607 = vld [vmem:[%s7 + $0x68] sm:$0xf]
  %v15608 = vld [vmem:[%s7 + $0x6c] sm:$0xf]
  %v15609 = vld [vmem:[%s7 + $0x70] sm:$0xf]
  %v15610 = vld [vmem:[%s7 + $0x74] sm:$0xf]
  %v15611 = vld [vmem:[%s7 + $0x78] sm:$0xf]
  %v15612 = vld [vmem:[%s7 + $0x7c] sm:$0xf]
  %v15613 = vld [vmem:[%s7 + $0x80] sm:$0xf]
  %v15614 = vld [vmem:[%s7 + $0x84] sm:$0xf]
  %v15615 = vld [vmem:[%s7 + $0x88] sm:$0xf]
  %v15616 = vld [vmem:[%s7 + $0x8c] sm:$0xf]
  %v15617 = vld [vmem:[%s7 + $0x90] sm:$0xf]
  %v15618 = vld [vmem:[%s7 + $0x94] sm:$0xf]
  %v15619 = vld [vmem:[%s7 + $0x98] sm:$0xf]
  %v15620 = vld [vmem:[%s7 + $0x9c] sm:$0xf]
  %v15621 = vld [vmem:[%s7 + $0xa0] sm:$0xf]
  %v15622 = vld [vmem:[%s7 + $0xa4] sm:$0xf]
  %v15623 = vld [vmem:[%s7 + $0xa8] sm:$0xf]
  %v15624 = vld [vmem:[%s7 + $0xac] sm:$0xf]
  %v15625 = vld [vmem:[%s7 + $0xb0] sm:$0xf]
  %v15626 = vld [vmem:[%s7 + $0xb4] sm:$0xf]
  %v15627 = vld [vmem:[%s7 + $0xb8] sm:$0xf]
  %v15628 = vld [vmem:[%s7 + $0xbc] sm:$0xf]
  %v15629 = vld [vmem:[%s7 + $0xc0] sm:$0xf]
  %v15630 = vld [vmem:[%s7 + $0xc4] sm:$0xf]
  %v15631 = vld [vmem:[%s7 + $0xc8] sm:$0xf]
  %v15632 = vld [vmem:[%s7 + $0xcc] sm:$0xf]
  %v15633 = vld [vmem:[%s7 + $0xd0] sm:$0xf]
  %v15634 = vld [vmem:[%s7 + $0xd4] sm:$0xf]
  %v15635 = vld [vmem:[%s7 + $0xd8] sm:$0xf]
  %v15636 = vld [vmem:[%s7 + $0xdc] sm:$0xf]
  %v15637 = vld [vmem:[%s7 + $0xe0] sm:$0xf]
  %v15638 = vld [vmem:[%s7 + $0xe4] sm:$0xf]
  %v15639 = vld [vmem:[%s7 + $0xe8] sm:$0xf]
  %v15640 = vld [vmem:[%s7 + $0xec] sm:$0xf]
  %v15641 = vld [vmem:[%s7 + $0xf0] sm:$0xf]
  %v15642 = vld [vmem:[%s7 + $0xf4] sm:$0xf]
  %v15643 = vld [vmem:[%s7 + $0xf8] sm:$0x3]
  %v15644 = vld [vmem:[%s8] sm:$0x1]
  %v15646 = vlaneseq
  %v15647 = vshrl.u32 %v15646, 7
  %v15648 = vsub.s32 0, %v15647
  %v15649 = vrot.slane %v15644, %v15648
  %v15714 = vunpack.c.l.b16 %v15581
  %v15715 = vunpack.c.l.b16 %v15582
  %v15716 = vunpack.c.l.b16 %v15583
  %v15717 = vunpack.c.l.b16 %v15584
  %v15718 = vunpack.c.l.b16 %v15585
  %v15719 = vunpack.c.l.b16 %v15586
  %v15720 = vunpack.c.l.b16 %v15587
  %v15721 = vunpack.c.l.b16 %v15588
  %v15722 = vunpack.c.l.b16 %v15589
  %v15723 = vunpack.c.l.b16 %v15590
  %v15724 = vunpack.c.l.b16 %v15591
  %v15725 = vunpack.c.l.b16 %v15592
  %v15726 = vunpack.c.l.b16 %v15593
  %v15727 = vunpack.c.l.b16 %v15594
  %v15728 = vunpack.c.l.b16 %v15595
  %v15729 = vunpack.c.l.b16 %v15596
  %v15730 = vunpack.c.l.b16 %v15597
  %v15731 = vunpack.c.l.b16 %v15598
  %v15732 = vunpack.c.l.b16 %v15599
  %v15733 = vunpack.c.l.b16 %v15600
  %v15734 = vunpack.c.l.b16 %v15601
  %v15735 = vunpack.c.l.b16 %v15602
  %v15736 = vunpack.c.l.b16 %v15603
  %v15737 = vunpack.c.l.b16 %v15604
  %v15738 = vunpack.c.l.b16 %v15605
  %v15739 = vunpack.c.l.b16 %v15606
  %v15740 = vunpack.c.l.b16 %v15607
  %v15741 = vunpack.c.l.b16 %v15608
  %v15742 = vunpack.c.l.b16 %v15609
  %v15743 = vunpack.c.l.b16 %v15610
  %v15744 = vunpack.c.l.b16 %v15611
  %v15745 = vunpack.c.l.b16 %v15612
  %v15746 = vunpack.c.l.b16 %v15613
  %v15747 = vunpack.c.l.b16 %v15614
  %v15748 = vunpack.c.l.b16 %v15615
  %v15749 = vunpack.c.l.b16 %v15616
  %v15750 = vunpack.c.l.b16 %v15617
  %v15751 = vunpack.c.l.b16 %v15618
  %v15752 = vunpack.c.l.b16 %v15619
  %v15753 = vunpack.c.l.b16 %v15620
  %v15754 = vunpack.c.l.b16 %v15621
  %v15755 = vunpack.c.l.b16 %v15622
  %v15756 = vunpack.c.l.b16 %v15623
  %v15757 = vunpack.c.l.b16 %v15624
  %v15758 = vunpack.c.l.b16 %v15625
  %v15759 = vunpack.c.l.b16 %v15626
  %v15760 = vunpack.c.l.b16 %v15627
  %v15761 = vunpack.c.l.b16 %v15628
  %v15762 = vunpack.c.l.b16 %v15629
  %v15763 = vunpack.c.l.b16 %v15630
  %v15764 = vunpack.c.l.b16 %v15631
  %v15765 = vunpack.c.l.b16 %v15632
  %v15766 = vunpack.c.l.b16 %v15633
  %v15767 = vunpack.c.l.b16 %v15634
  %v15768 = vunpack.c.l.b16 %v15635
  %v15769 = vunpack.c.l.b16 %v15636
  %v15770 = vunpack.c.l.b16 %v15637
  %v15771 = vunpack.c.l.b16 %v15638
  %v15772 = vunpack.c.l.b16 %v15639
  %v15773 = vunpack.c.l.b16 %v15640
  %v15774 = vunpack.c.l.b16 %v15641
  %v15775 = vunpack.c.l.b16 %v15642
  %v15776 = vunpack.c.l.b16 %v15643
  %v15777 = vpack.c.b16 %v15715, %v15714
  %v15778 = vpack.c.b16 %v15717, %v15716
  %v15779 = vpack.c.b16 %v15719, %v15718
  %v15780 = vpack.c.b16 %v15721, %v15720
  %v15781 = vpack.c.b16 %v15723, %v15722
  %v15782 = vpack.c.b16 %v15725, %v15724
  %v15783 = vpack.c.b16 %v15727, %v15726
  %v15784 = vpack.c.b16 %v15729, %v15728
  %v15785 = vpack.c.b16 %v15731, %v15730
  %v15786 = vpack.c.b16 %v15733, %v15732
  %v15787 = vpack.c.b16 %v15735, %v15734
  %v15788 = vpack.c.b16 %v15737, %v15736
  %v15789 = vpack.c.b16 %v15739, %v15738
  %v15790 = vpack.c.b16 %v15741, %v15740
  %v15791 = vpack.c.b16 %v15743, %v15742
  %v15792 = vpack.c.b16 %v15745, %v15744
  %v15793 = vpack.c.b16 %v15747, %v15746
  %v15794 = vpack.c.b16 %v15749, %v15748
  %v15795 = vpack.c.b16 %v15751, %v15750
  %v15796 = vpack.c.b16 %v15753, %v15752
  %v15797 = vpack.c.b16 %v15755, %v15754
  %v15798 = vpack.c.b16 %v15757, %v15756
  %v15799 = vpack.c.b16 %v15759, %v15758
  %v15800 = vpack.c.b16 %v15761, %v15760
  %v15801 = vpack.c.b16 %v15763, %v15762
  %v15802 = vpack.c.b16 %v15765, %v15764
  %v15803 = vpack.c.b16 %v15767, %v15766
  %v15804 = vpack.c.b16 %v15769, %v15768
  %v15805 = vpack.c.b16 %v15771, %v15770
  %v15806 = vpack.c.b16 %v15773, %v15772
  %v15807 = vpack.c.b16 %v15775, %v15774
  %v15808 = vpack.c.b16 %v15776, %v15776
  %v15841 = vsel %vm13122, %v15580, 0
  %v15844 = vsel %vm13219, %v15808, 0
  %15846 = vmatprep.subr.bf16.mxu0 0
  %15847 = vmatpush1.bf16.msra.mxu0 %v15777
  %15848 = vmatprep.subr.bf16.mxu0 0
  %15849 = vmatpush1.bf16.msra.mxu0 %v15778
  %15850 = vmatprep.subr.bf16.mxu0 0
  %15851 = vmatpush1.bf16.msra.mxu0 %v15779
  %15852 = vmatprep.subr.bf16.mxu0 0
  %15853 = vmatpush1.bf16.msra.mxu0 %v15780
  %15854 = vmatprep.subr.bf16.mxu0 0
  %15855 = vmatpush1.bf16.msra.mxu0 %v15781
  %15856 = vmatprep.subr.bf16.mxu0 0
  %15857 = vmatpush1.bf16.msra.mxu0 %v15782
  %15858 = vmatprep.subr.bf16.mxu0 0
  %15859 = vmatpush1.bf16.msra.mxu0 %v15783
  %15860 = vmatprep.subr.bf16.mxu0 0
  %15861 = vmatpush1.bf16.msra.mxu0 %v15784
  %15862 = vmatprep.subr.bf16.mxu0 0
  %15863 = vmatpush1.bf16.msra.mxu0 %v15785
  %15864 = vmatprep.subr.bf16.mxu0 0
  %15865 = vmatpush1.bf16.msra.mxu0 %v15786
  %15866 = vmatprep.subr.bf16.mxu0 0
  %15867 = vmatpush1.bf16.msra.mxu0 %v15787
  %15868 = vmatprep.subr.bf16.mxu0 0
  %15869 = vmatpush1.bf16.msra.mxu0 %v15788
  %15870 = vmatprep.subr.bf16.mxu0 0
  %15871 = vmatpush1.bf16.msra.mxu0 %v15789
  %15872 = vmatprep.subr.bf16.mxu0 0
  %15873 = vmatpush1.bf16.msra.mxu0 %v15790
  %15874 = vmatprep.subr.bf16.mxu0 0
  %15875 = vmatpush1.bf16.msra.mxu0 %v15791
  %15876 = vmatprep.subr.bf16.mxu0 0
  %15877 = vmatpush1.bf16.msra.mxu0 %v15792
  %15878 = vmatprep.mubr.bf16.mxu0 %v15578
  %15879 = vmatmul.mubr.bf16.gmra.mrb[0].mxu0 %v15577
  %v15880 = vpop.f32.mrb[0].mxu0
  %v15881 = vadd.f32 %v15649, %v15880
  %v15882 = vpop.f32.mrb[0].mxu0
  %v15883 = vpop.f32.mrb[0].mxu0
  %v15884 = vpop.f32.mrb[0].mxu0
  %15885 = vdwg.mxu0
  %15886 = vmatprep.subr.bf16.mxu0 0
  %15887 = vmatpush1.bf16.msra.mxu0 %v15793
  %15888 = vmatprep.subr.bf16.mxu0 0
  %15889 = vmatpush1.bf16.msra.mxu0 %v15794
  %15890 = vmatprep.subr.bf16.mxu0 0
  %15891 = vmatpush1.bf16.msra.mxu0 %v15795
  %15892 = vmatprep.subr.bf16.mxu0 0
  %15893 = vmatpush1.bf16.msra.mxu0 %v15796
  %15894 = vmatprep.subr.bf16.mxu0 0
  %15895 = vmatpush1.bf16.msra.mxu0 %v15797
  %15896 = vmatprep.subr.bf16.mxu0 0
  %15897 = vmatpush1.bf16.msra.mxu0 %v15798
  %15898 = vmatprep.subr.bf16.mxu0 0
  %15899 = vmatpush1.bf16.msra.mxu0 %v15799
  %15900 = vmatprep.subr.bf16.mxu0 0
  %15901 = vmatpush1.bf16.msra.mxu0 %v15800
  %15902 = vmatprep.subr.bf16.mxu0 0
  %15903 = vmatpush1.bf16.msra.mxu0 %v15801
  %15904 = vmatprep.subr.bf16.mxu0 0
  %15905 = vmatpush1.bf16.msra.mxu0 %v15802
  %15906 = vmatprep.subr.bf16.mxu0 0
  %15907 = vmatpush1.bf16.msra.mxu0 %v15803
  %15908 = vmatprep.subr.bf16.mxu0 0
  %15909 = vmatpush1.bf16.msra.mxu0 %v15804
  %15910 = vmatprep.subr.bf16.mxu0 0
  %15911 = vmatpush1.bf16.msra.mxu0 %v15805
  %15912 = vmatprep.subr.bf16.mxu0 0
  %15913 = vmatpush1.bf16.msra.mxu0 %v15806
  %15914 = vmatprep.subr.bf16.mxu0 0
  %15915 = vmatpush1.bf16.msra.mxu0 %v15807
  %15916 = vmatprep.subr.bf16.mxu0 0
  %15917 = vmatpush1.bf16.msra.mxu0 %v15844
  %15918 = vmatprep.mubr.bf16.mxu0 %v15841
  %15919 = vmatmul.mubr.bf16.gmra.mrb[0].mxu0 %v15579
  %v15920 = vpop.f32.mrb[0].mxu0
  %v15921 = vadd.f32 %v15881, %v15920
  %v15922 = vpop.f32.mrb[0].mxu0
  %v15923 = vpop.f32.mrb[0].mxu0
  %v15924 = vpop.f32.mrb[0].mxu0
  %15925 = vdwg.mxu0
  %v15926 = vsel %vm14012, %v15921, -inf
  %15927 = vmax.xlane.f32.xlu0 %v15926
  %v15928 = vpop.xlane.xlu0 %15927
  %v15929 = vsub.f32 %v15921, %v15928
  %v15930 = vmul.f32 %v15929, 1.442695
  %v15931 = vpow.pop %v15930
  %v15932 = vsel %vm14012, %v15931, 0.0
  %15933 = vadd.xlane.f32.xlu0 %v15932
  %v15934 = vpop.xlane.xlu0 %15933
  %v15935 = vlog2.pop %v15934
  %v15936 = vmul.f32 %v15935, 0.6931472
  %v15937 = vsub.f32 %v15929, %v15936
  %15938 = vst.msk [vmem:[%s9] sm:$0xff] %vm14012, %v15937
  // Predicated region
  $region38: #{net_forward.1} parent=0 // pred_check
    _
  $region39: #{net_forward.1} parent=0 // pred_check_branch
    %15940 = sbr.rel (0) target = $region41
  $region40: #{net_forward.1} parent=0 // pred_region
    _
  $region41: #{net_forward.1} parent=0 // pred_fallthru
    _
  // Predicated region
  $region42: #{net_forward.1} parent=0 // pred_check
    _
  $region43: #{net_forward.1} parent=0 // pred_check_branch
    %15942 = sbr.rel (0) target = $region45
  $region44: #{net_forward.1} parent=0 // pred_region
    _
  $region45: #{net_forward.1} parent=0 // pred_fallthru
    _

</llo_original>
